<compile_context>
chip_gen: v6e
topology: v6e:2x2x1
jax: 0.10.0
libtpu: 0.0.40
codegen_flags: <defaults>
</compile_context>

<pallas_src>
import math
import jax
import jax.numpy as jnp
from jax.experimental import pallas as pl
from jax.experimental.pallas import tpu as pltpu

NOISE_DIM = 100
NOISE_PAD = 128            # lane-aligned noise feature dim (in-kernel pad)
IMAGE_SHAPE = (1, 28, 28)
OUT_DIM = 1 * 28 * 28      # 784, stored directly (masked store on last vreg only)
EPS = 1e-5                 # PyTorch BatchNorm1d default eps
SLOPE = 0.2                # LeakyReLU negative slope


def _leaky_relu(x):
    return jnp.where(x > 0, x, SLOPE * x)


def _bn_leaky(h, gamma, beta):
    """Training-mode BatchNorm1d (biased variance) fused to one FMA, then LeakyReLU.

    One-pass stats: var = E[h^2] - E[h]^2, clamped at 0 to guard against f32
    cancellation.  All elementwise math stays f32; rsqrt goes to the EUP slot.
    """
    mean = jnp.mean(h, axis=0, keepdims=True)
    mean_sq = jnp.mean(h * h, axis=0, keepdims=True)
    var = jnp.maximum(mean_sq - mean * mean, 0.0)
    s = gamma * jax.lax.rsqrt(var + EPS)       # per-feature scale
    t = beta - mean * s                        # per-feature shift
    return _leaky_relu(h * s + t)


def generator_kernel(x_ref,
                     w1_ref, b1_ref,
                     w2_ref, g2_ref, be2_ref,
                     w3_ref, g3_ref, be3_ref,
                     w4_ref, s4_ref, g4_ref, be4_ref,
                     w5_ref, s5_ref, b5_ref,
                     o_ref, xpad_ref):
    # Fold the 100 -> 128 noise pad + bf16 cast into the kernel: zero the f32
    # scratch, masked-store the 100 real lanes, reload lane-dense, cast for MXU.
    xpad_ref[...] = jnp.zeros_like(xpad_ref)
    xpad_ref[:, :NOISE_DIM] = x_ref[...]
    x = xpad_ref[...].astype(jnp.bfloat16)

    # block(noise, 128, norm=False): Linear -> LeakyReLU(0.2)
    h = jnp.dot(x, w1_ref[...], preferred_element_type=jnp.float32) + b1_ref[...]
    h = _leaky_relu(h)                                           # f32

    # block(128, 256): Linear (bias cancels under training-mode BN) -> BN -> LeakyReLU
    h = jnp.dot(h.astype(jnp.bfloat16), w2_ref[...],
                preferred_element_type=jnp.float32)
    h = _bn_leaky(h, g2_ref[...], be2_ref[...])

    # block(256, 512)
    h = jnp.dot(h.astype(jnp.bfloat16), w3_ref[...],
                preferred_element_type=jnp.float32)
    h = _bn_leaky(h, g3_ref[...], be3_ref[...])

    # block(512, 1024): int8 weight -> dequant to bf16 on the VPU; per-column
    # scale applied once on the (much smaller) f32 accumulator.
    w4 = w4_ref[...].astype(jnp.float32).astype(jnp.bfloat16)
    h = jnp.dot(h.astype(jnp.bfloat16), w4,
                preferred_element_type=jnp.float32) * s4_ref[...]
    h = _bn_leaky(h, g4_ref[...], be4_ref[...])

    # Linear(1024, 784) -> Tanh, stored directly at the final 784 width.
    w5 = w5_ref[...].astype(jnp.float32).astype(jnp.bfloat16)
    out = jnp.dot(h.astype(jnp.bfloat16), w5,
                  preferred_element_type=jnp.float32) * s5_ref[...] + b5_ref[...]
    o_ref[...] = jnp.tanh(out).astype(o_ref.dtype)


def _quantize_per_col(w):
    """Symmetric int8 quantization with one f32 scale per output channel (column)."""
    amax = jnp.max(jnp.abs(w), axis=0, keepdims=True)
    scale = jnp.maximum(amax, 1e-8) / 127.0
    q = jnp.clip(jnp.round(w / scale), -127.0, 127.0).astype(jnp.int8)
    return q, scale.astype(jnp.float32)


def init_params(key):
    """Init mimicking PyTorch nn.Linear default: U(-1/sqrt(fan_in), 1/sqrt(fan_in)).

    Weights are stored transposed (in, out).  w1 is zero-padded 100->128 rows
    (exact).  w2/w3 are bf16; w4/w5 are int8 with per-column f32 scales.
    b2/b3/b4 are generated (parameter-structure parity) but never shipped: they
    cancel exactly under training-mode BatchNorm.
    """
    dims = [(NOISE_DIM, 128), (128, 256), (256, 512), (512, 1024), (1024, OUT_DIM)]
    keys = jax.random.split(key, 2 * len(dims))
    ws, bs = [], []
    for i, (fan_in, fan_out) in enumerate(dims):
        bound = 1.0 / math.sqrt(fan_in)
        ws.append(jax.random.uniform(keys[2 * i], (fan_in, fan_out),
                                     jnp.float32, -bound, bound))
        bs.append(jax.random.uniform(keys[2 * i + 1], (1, fan_out),
                                     jnp.float32, -bound, bound))
    params = {}
    w1 = jnp.zeros((NOISE_PAD, 128), jnp.float32).at[:NOISE_DIM, :].set(ws[0])
    params["w1"] = w1.astype(jnp.bfloat16)
    params["b1"] = bs[0]
    params["w2"] = ws[1].astype(jnp.bfloat16)
    params["w3"] = ws[2].astype(jnp.bfloat16)
    params["w4"], params["s4"] = _quantize_per_col(ws[3])
    params["w5"], params["s5"] = _quantize_per_col(ws[4])
    params["b5"] = bs[4]
    # BatchNorm affine params (layers 2, 3, 4): gamma=1, beta=0 (PyTorch default).
    for i, d in zip((2, 3, 4), (256, 512, 1024)):
        params[f"g{i}"] = jnp.ones((1, d), jnp.float32)
        params[f"be{i}"] = jnp.zeros((1, d), jnp.float32)
    return params


def generator_forward(x, params):
    B = x.shape[0]
    args = (
        x.astype(jnp.float32),
        params["w1"], params["b1"],
        params["w2"], params["g2"], params["be2"],
        params["w3"], params["g3"], params["be3"],
        params["w4"], params["s4"], params["g4"], params["be4"],
        params["w5"], params["s5"], params["b5"],
    )
    vmem_spec = pl.BlockSpec(memory_space=pltpu.MemorySpace.VMEM)

    flops = 2 * B * (NOISE_PAD * 128 + 128 * 256 + 256 * 512 + 512 * 1024
                     + 1024 * OUT_DIM)
    transcendentals = B * OUT_DIM + (256 + 512 + 1024)      # tanh + BN rsqrt
    bytes_accessed = (sum(int(a.size) * a.dtype.itemsize for a in args)
                      + B * OUT_DIM * 4)

    flat = pl.pallas_call(
        generator_kernel,
        out_shape=jax.ShapeDtypeStruct((B, OUT_DIM), jnp.float32),
        in_specs=[vmem_spec] * len(args),
        out_specs=vmem_spec,
        scratch_shapes=[pltpu.VMEM((B, NOISE_PAD), jnp.float32)],
        compiler_params=pltpu.CompilerParams(
            # 48 MiB fits v7x's 64 MiB physical VMEM; v5e/v6e (128 MiB) could go
            # higher, but the real footprint here is only a few MiB.
            vmem_limit_bytes=48 * 1024 * 1024),
        cost_estimate=pl.CostEstimate(flops=flops,
                                      transcendentals=transcendentals,
                                      bytes_accessed=bytes_accessed),
    )(*args)
    # PyTorch: x.view(-1, 1, 28, 28) -- a free contiguous view, no de-pad copy.
    return flat.reshape(-1, *IMAGE_SHAPE)


if __name__ == "__main__":
    key = jax.random.PRNGKey(0)
    pkey, xkey = jax.random.split(key)
    params = init_params(pkey)

    # B = 256 fills the 256-wide MXU rows on v6e/v7x and amortizes weight DMA;
    # v5e's 128-wide MXU is also fully occupied.
    B = 256
    x = jax.random.normal(xkey, (B, NOISE_DIM), jnp.float32)

    out = jax.block_until_ready(generator_forward(x, params))

    assert out.shape == (B, 1, 28, 28), out.shape
    assert bool(jnp.all(jnp.isfinite(out)))
    assert bool(jnp.all(jnp.abs(out) <= 1.0 + 1e-6))  # tanh range
    print("KERNEL_OK")
</pallas_src>

<mosaic_0001>
module attributes {stable_mosaic.version = 11 : i64} {
  func.func @generator_kernel(%arg0: memref<256x100xf32, #tpu.memory_space<vmem>>, %arg1: memref<128x128xbf16, #tpu.memory_space<vmem>>, %arg2: memref<1x128xf32, #tpu.memory_space<vmem>>, %arg3: memref<128x256xbf16, #tpu.memory_space<vmem>>, %arg4: memref<1x256xf32, #tpu.memory_space<vmem>>, %arg5: memref<1x256xf32, #tpu.memory_space<vmem>>, %arg6: memref<256x512xbf16, #tpu.memory_space<vmem>>, %arg7: memref<1x512xf32, #tpu.memory_space<vmem>>, %arg8: memref<1x512xf32, #tpu.memory_space<vmem>>, %arg9: memref<512x1024xi8, #tpu.memory_space<vmem>>, %arg10: memref<1x1024xf32, #tpu.memory_space<vmem>>, %arg11: memref<1x1024xf32, #tpu.memory_space<vmem>>, %arg12: memref<1x1024xf32, #tpu.memory_space<vmem>>, %arg13: memref<1024x784xi8, #tpu.memory_space<vmem>>, %arg14: memref<1x784xf32, #tpu.memory_space<vmem>>, %arg15: memref<1x784xf32, #tpu.memory_space<vmem>>, %arg16: memref<256x784xf32, #tpu.memory_space<vmem>>, %arg17: memref<256x128xf32, #tpu.memory_space<vmem>>) attributes {dimension_semantics = [], scalar_prefetch = 0 : i64, scratch_operands = 1 : i64, tpu.core_type = #tpu.core_type<tc>} {
    %cst = arith.constant 0.000000e+00 : f32
    %0 = vector.broadcast %cst : f32 to vector<256x128xf32>
    %c0 = arith.constant 0 : index
    %c0_0 = arith.constant 0 : index
    %1 = vector.load %arg17[%c0, %c0_0] : memref<256x128xf32, #tpu.memory_space<vmem>>, vector<256x128xf32>
    tpu.vector_store %arg17[%c0, %c0_0], %0 {strides = array<i32>} : memref<256x128xf32, #tpu.memory_space<vmem>>, vector<256x128xf32>,
    %c0_1 = arith.constant 0 : index
    %c0_2 = arith.constant 0 : index
    %2 = vector.load %arg0[%c0_1, %c0_2] : memref<256x100xf32, #tpu.memory_space<vmem>>, vector<256x100xf32>
    %c0_3 = arith.constant 0 : index
    %c0_4 = arith.constant 0 : index
    %3 = vector.load %arg17[%c0_3, %c0_4] : memref<256x128xf32, #tpu.memory_space<vmem>>, vector<256x100xf32>
    tpu.vector_store %arg17[%c0_3, %c0_4], %2 {strides = array<i32>} : memref<256x128xf32, #tpu.memory_space<vmem>>, vector<256x100xf32>,
    %c0_5 = arith.constant 0 : index
    %c0_6 = arith.constant 0 : index
    %4 = vector.load %arg17[%c0_5, %c0_6] : memref<256x128xf32, #tpu.memory_space<vmem>>, vector<256x128xf32>
    %5 = arith.truncf %4 : vector<256x128xf32> to vector<256x128xbf16>
    %c0_7 = arith.constant 0 : index
    %c0_8 = arith.constant 0 : index
    %6 = vector.load %arg1[%c0_7, %c0_8] : memref<128x128xbf16, #tpu.memory_space<vmem>>, vector<128x128xbf16>
    %cst_9 = arith.constant dense<0.000000e+00> : vector<256x128xf32>
    %7 = tpu.matmul %5, %6, %cst_9 {dimension_numbers = #tpu.dot_dimension_numbers<[1], [0], [0], [1], [0, 0, 1, 1], [], []>} : vector<256x128xbf16>, vector<128x128xbf16>, vector<256x128xf32> -> vector<256x128xf32>
    %c0_10 = arith.constant 0 : index
    %c0_11 = arith.constant 0 : index
    %8 = vector.load %arg2[%c0_10, %c0_11] : memref<1x128xf32, #tpu.memory_space<vmem>>, vector<1x128xf32>
    %9 = vector.broadcast %8 : vector<1x128xf32> to vector<256x128xf32>
    %10 = arith.addf %7, %9 : vector<256x128xf32>
    %cst_12 = arith.constant 0.000000e+00 : f32
    %11 = vector.broadcast %cst_12 : f32 to vector<256x128xf32>
    %12 = arith.cmpf ogt, %10, %11 : vector<256x128xf32>
    %cst_13 = arith.constant 2.000000e-01 : f32
    %13 = vector.broadcast %cst_13 : f32 to vector<256x128xf32>
    %14 = arith.mulf %13, %10 : vector<256x128xf32>
    %15 = arith.select %12, %10, %14 : vector<256x128xi1>, vector<256x128xf32>
    %16 = arith.truncf %15 : vector<256x128xf32> to vector<256x128xbf16>
    %c0_14 = arith.constant 0 : index
    %c0_15 = arith.constant 0 : index
    %17 = vector.load %arg3[%c0_14, %c0_15] : memref<128x256xbf16, #tpu.memory_space<vmem>>, vector<128x256xbf16>
    %cst_16 = arith.constant dense<0.000000e+00> : vector<256x256xf32>
    %18 = tpu.matmul %16, %17, %cst_16 {dimension_numbers = #tpu.dot_dimension_numbers<[1], [0], [0], [1], [0, 0, 1, 1], [], []>} : vector<256x128xbf16>, vector<128x256xbf16>, vector<256x256xf32> -> vector<256x256xf32>
    %c0_17 = arith.constant 0 : index
    %c0_18 = arith.constant 0 : index
    %19 = vector.load %arg4[%c0_17, %c0_18] : memref<1x256xf32, #tpu.memory_space<vmem>>, vector<1x256xf32>
    %c0_19 = arith.constant 0 : index
    %c0_20 = arith.constant 0 : index
    %20 = vector.load %arg5[%c0_19, %c0_20] : memref<1x256xf32, #tpu.memory_space<vmem>>, vector<1x256xf32>
    %cst_21 = arith.constant dense<0.000000e+00> : vector<256xf32>
    %21 = vector.multi_reduction <add>, %18, %cst_21 [0] : vector<256x256xf32> to vector<256xf32>
    %22 = vector.shape_cast %21 : vector<256xf32> to vector<1x256xf32>
    %cst_22 = arith.constant 2.560000e+02 : f32
    %23 = vector.broadcast %cst_22 : f32 to vector<1x256xf32>
    %24 = arith.divf %22, %23 : vector<1x256xf32>
    %25 = arith.mulf %18, %18 : vector<256x256xf32>
    %cst_23 = arith.constant dense<0.000000e+00> : vector<256xf32>
    %26 = vector.multi_reduction <add>, %25, %cst_23 [0] : vector<256x256xf32> to vector<256xf32>
    %27 = vector.shape_cast %26 : vector<256xf32> to vector<1x256xf32>
    %cst_24 = arith.constant 2.560000e+02 : f32
    %28 = vector.broadcast %cst_24 : f32 to vector<1x256xf32>
    %29 = arith.divf %27, %28 : vector<1x256xf32>
    %30 = arith.mulf %24, %24 : vector<1x256xf32>
    %31 = arith.subf %29, %30 : vector<1x256xf32>
    %cst_25 = arith.constant 0.000000e+00 : f32
    %32 = vector.broadcast %cst_25 : f32 to vector<1x256xf32>
    %33 = arith.maximumf %31, %32 : vector<1x256xf32>
    %cst_26 = arith.constant 9.99999974E-6 : f32
    %34 = vector.broadcast %cst_26 : f32 to vector<1x256xf32>
    %35 = arith.addf %33, %34 : vector<1x256xf32>
    %36 = math.rsqrt %35 : vector<1x256xf32>
    %37 = arith.mulf %19, %36 : vector<1x256xf32>
    %38 = arith.mulf %24, %37 : vector<1x256xf32>
    %39 = arith.subf %20, %38 : vector<1x256xf32>
    %40 = vector.broadcast %37 : vector<1x256xf32> to vector<256x256xf32>
    %41 = arith.mulf %18, %40 : vector<256x256xf32>
    %42 = vector.broadcast %39 : vector<1x256xf32> to vector<256x256xf32>
    %43 = arith.addf %41, %42 : vector<256x256xf32>
    %cst_27 = arith.constant 0.000000e+00 : f32
    %44 = vector.broadcast %cst_27 : f32 to vector<256x256xf32>
    %45 = arith.cmpf ogt, %43, %44 : vector<256x256xf32>
    %cst_28 = arith.constant 2.000000e-01 : f32
    %46 = vector.broadcast %cst_28 : f32 to vector<256x256xf32>
    %47 = arith.mulf %46, %43 : vector<256x256xf32>
    %48 = arith.select %45, %43, %47 : vector<256x256xi1>, vector<256x256xf32>
    %49 = arith.truncf %48 : vector<256x256xf32> to vector<256x256xbf16>
    %c0_29 = arith.constant 0 : index
    %c0_30 = arith.constant 0 : index
    %50 = vector.load %arg6[%c0_29, %c0_30] : memref<256x512xbf16, #tpu.memory_space<vmem>>, vector<256x512xbf16>
    %cst_31 = arith.constant dense<0.000000e+00> : vector<256x512xf32>
    %51 = tpu.matmul %49, %50, %cst_31 {dimension_numbers = #tpu.dot_dimension_numbers<[1], [0], [0], [1], [0, 0, 1, 1], [], []>} : vector<256x256xbf16>, vector<256x512xbf16>, vector<256x512xf32> -> vector<256x512xf32>
    %c0_32 = arith.constant 0 : index
    %c0_33 = arith.constant 0 : index
    %52 = vector.load %arg7[%c0_32, %c0_33] : memref<1x512xf32, #tpu.memory_space<vmem>>, vector<1x512xf32>
    %c0_34 = arith.constant 0 : index
    %c0_35 = arith.constant 0 : index
    %53 = vector.load %arg8[%c0_34, %c0_35] : memref<1x512xf32, #tpu.memory_space<vmem>>, vector<1x512xf32>
    %cst_36 = arith.constant dense<0.000000e+00> : vector<512xf32>
    %54 = vector.multi_reduction <add>, %51, %cst_36 [0] : vector<256x512xf32> to vector<512xf32>
    %55 = vector.shape_cast %54 : vector<512xf32> to vector<1x512xf32>
    %cst_37 = arith.constant 2.560000e+02 : f32
    %56 = vector.broadcast %cst_37 : f32 to vector<1x512xf32>
    %57 = arith.divf %55, %56 : vector<1x512xf32>
    %58 = arith.mulf %51, %51 : vector<256x512xf32>
    %cst_38 = arith.constant dense<0.000000e+00> : vector<512xf32>
    %59 = vector.multi_reduction <add>, %58, %cst_38 [0] : vector<256x512xf32> to vector<512xf32>
    %60 = vector.shape_cast %59 : vector<512xf32> to vector<1x512xf32>
    %cst_39 = arith.constant 2.560000e+02 : f32
    %61 = vector.broadcast %cst_39 : f32 to vector<1x512xf32>
    %62 = arith.divf %60, %61 : vector<1x512xf32>
    %63 = arith.mulf %57, %57 : vector<1x512xf32>
    %64 = arith.subf %62, %63 : vector<1x512xf32>
    %cst_40 = arith.constant 0.000000e+00 : f32
    %65 = vector.broadcast %cst_40 : f32 to vector<1x512xf32>
    %66 = arith.maximumf %64, %65 : vector<1x512xf32>
    %cst_41 = arith.constant 9.99999974E-6 : f32
    %67 = vector.broadcast %cst_41 : f32 to vector<1x512xf32>
    %68 = arith.addf %66, %67 : vector<1x512xf32>
    %69 = math.rsqrt %68 : vector<1x512xf32>
    %70 = arith.mulf %52, %69 : vector<1x512xf32>
    %71 = arith.mulf %57, %70 : vector<1x512xf32>
    %72 = arith.subf %53, %71 : vector<1x512xf32>
    %73 = vector.broadcast %70 : vector<1x512xf32> to vector<256x512xf32>
    %74 = arith.mulf %51, %73 : vector<256x512xf32>
    %75 = vector.broadcast %72 : vector<1x512xf32> to vector<256x512xf32>
    %76 = arith.addf %74, %75 : vector<256x512xf32>
    %cst_42 = arith.constant 0.000000e+00 : f32
    %77 = vector.broadcast %cst_42 : f32 to vector<256x512xf32>
    %78 = arith.cmpf ogt, %76, %77 : vector<256x512xf32>
    %cst_43 = arith.constant 2.000000e-01 : f32
    %79 = vector.broadcast %cst_43 : f32 to vector<256x512xf32>
    %80 = arith.mulf %79, %76 : vector<256x512xf32>
    %81 = arith.select %78, %76, %80 : vector<256x512xi1>, vector<256x512xf32>
    %c0_44 = arith.constant 0 : index
    %c0_45 = arith.constant 0 : index
    %82 = vector.load %arg9[%c0_44, %c0_45] : memref<512x1024xi8, #tpu.memory_space<vmem>>, vector<512x1024xi8>
    %83 = arith.sitofp %82 : vector<512x1024xi8> to vector<512x1024xf32>
    %84 = arith.truncf %83 : vector<512x1024xf32> to vector<512x1024xbf16>
    %85 = arith.truncf %81 : vector<256x512xf32> to vector<256x512xbf16>
    %cst_46 = arith.constant dense<0.000000e+00> : vector<256x1024xf32>
    %86 = tpu.matmul %85, %84, %cst_46 {dimension_numbers = #tpu.dot_dimension_numbers<[1], [0], [0], [1], [0, 0, 1, 1], [], []>} : vector<256x512xbf16>, vector<512x1024xbf16>, vector<256x1024xf32> -> vector<256x1024xf32>
    %c0_47 = arith.constant 0 : index
    %c0_48 = arith.constant 0 : index
    %87 = vector.load %arg10[%c0_47, %c0_48] : memref<1x1024xf32, #tpu.memory_space<vmem>>, vector<1x1024xf32>
    %88 = vector.broadcast %87 : vector<1x1024xf32> to vector<256x1024xf32>
    %89 = arith.mulf %86, %88 : vector<256x1024xf32>
    %c0_49 = arith.constant 0 : index
    %c0_50 = arith.constant 0 : index
    %90 = vector.load %arg11[%c0_49, %c0_50] : memref<1x1024xf32, #tpu.memory_space<vmem>>, vector<1x1024xf32>
    %c0_51 = arith.constant 0 : index
    %c0_52 = arith.constant 0 : index
    %91 = vector.load %arg12[%c0_51, %c0_52] : memref<1x1024xf32, #tpu.memory_space<vmem>>, vector<1x1024xf32>
    %cst_53 = arith.constant dense<0.000000e+00> : vector<1024xf32>
    %92 = vector.multi_reduction <add>, %89, %cst_53 [0] : vector<256x1024xf32> to vector<1024xf32>
    %93 = vector.shape_cast %92 : vector<1024xf32> to vector<1x1024xf32>
    %cst_54 = arith.constant 2.560000e+02 : f32
    %94 = vector.broadcast %cst_54 : f32 to vector<1x1024xf32>
    %95 = arith.divf %93, %94 : vector<1x1024xf32>
    %96 = arith.mulf %89, %89 : vector<256x1024xf32>
    %cst_55 = arith.constant dense<0.000000e+00> : vector<1024xf32>
    %97 = vector.multi_reduction <add>, %96, %cst_55 [0] : vector<256x1024xf32> to vector<1024xf32>
    %98 = vector.shape_cast %97 : vector<1024xf32> to vector<1x1024xf32>
    %cst_56 = arith.constant 2.560000e+02 : f32
    %99 = vector.broadcast %cst_56 : f32 to vector<1x1024xf32>
    %100 = arith.divf %98, %99 : vector<1x1024xf32>
    %101 = arith.mulf %95, %95 : vector<1x1024xf32>
    %102 = arith.subf %100, %101 : vector<1x1024xf32>
    %cst_57 = arith.constant 0.000000e+00 : f32
    %103 = vector.broadcast %cst_57 : f32 to vector<1x1024xf32>
    %104 = arith.maximumf %102, %103 : vector<1x1024xf32>
    %cst_58 = arith.constant 9.99999974E-6 : f32
    %105 = vector.broadcast %cst_58 : f32 to vector<1x1024xf32>
    %106 = arith.addf %104, %105 : vector<1x1024xf32>
    %107 = math.rsqrt %106 : vector<1x1024xf32>
    %108 = arith.mulf %90, %107 : vector<1x1024xf32>
    %109 = arith.mulf %95, %108 : vector<1x1024xf32>
    %110 = arith.subf %91, %109 : vector<1x1024xf32>
    %111 = vector.broadcast %108 : vector<1x1024xf32> to vector<256x1024xf32>
    %112 = arith.mulf %89, %111 : vector<256x1024xf32>
    %113 = vector.broadcast %110 : vector<1x1024xf32> to vector<256x1024xf32>
    %114 = arith.addf %112, %113 : vector<256x1024xf32>
    %cst_59 = arith.constant 0.000000e+00 : f32
    %115 = vector.broadcast %cst_59 : f32 to vector<256x1024xf32>
    %116 = arith.cmpf ogt, %114, %115 : vector<256x1024xf32>
    %cst_60 = arith.constant 2.000000e-01 : f32
    %117 = vector.broadcast %cst_60 : f32 to vector<256x1024xf32>
    %118 = arith.mulf %117, %114 : vector<256x1024xf32>
    %119 = arith.select %116, %114, %118 : vector<256x1024xi1>, vector<256x1024xf32>
    %c0_61 = arith.constant 0 : index
    %c0_62 = arith.constant 0 : index
    %120 = vector.load %arg13[%c0_61, %c0_62] : memref<1024x784xi8, #tpu.memory_space<vmem>>, vector<1024x784xi8>
    %121 = arith.sitofp %120 : vector<1024x784xi8> to vector<1024x784xf32>
    %122 = arith.truncf %121 : vector<1024x784xf32> to vector<1024x784xbf16>
    %123 = arith.truncf %119 : vector<256x1024xf32> to vector<256x1024xbf16>
    %cst_63 = arith.constant dense<0.000000e+00> : vector<256x784xf32>
    %124 = tpu.matmul %123, %122, %cst_63 {dimension_numbers = #tpu.dot_dimension_numbers<[1], [0], [0], [1], [0, 0, 1, 1], [], []>} : vector<256x1024xbf16>, vector<1024x784xbf16>, vector<256x784xf32> -> vector<256x784xf32>
    %c0_64 = arith.constant 0 : index
    %c0_65 = arith.constant 0 : index
    %125 = vector.load %arg14[%c0_64, %c0_65] : memref<1x784xf32, #tpu.memory_space<vmem>>, vector<1x784xf32>
    %126 = vector.broadcast %125 : vector<1x784xf32> to vector<256x784xf32>
    %127 = arith.mulf %124, %126 : vector<256x784xf32>
    %c0_66 = arith.constant 0 : index
    %c0_67 = arith.constant 0 : index
    %128 = vector.load %arg15[%c0_66, %c0_67] : memref<1x784xf32, #tpu.memory_space<vmem>>, vector<1x784xf32>
    %129 = vector.broadcast %128 : vector<1x784xf32> to vector<256x784xf32>
    %130 = arith.addf %127, %129 : vector<256x784xf32>
    %131 = math.tanh %130 : vector<256x784xf32>
    %c0_68 = arith.constant 0 : index
    %c0_69 = arith.constant 0 : index
    %132 = vector.load %arg16[%c0_68, %c0_69] : memref<256x784xf32, #tpu.memory_space<vmem>>, vector<256x784xf32>
    tpu.vector_store %arg16[%c0_68, %c0_69], %131 {strides = array<i32>} : memref<256x784xf32, #tpu.memory_space<vmem>>, vector<256x784xf32>,
    return
  }
}

</mosaic_0001>

<llo_original>
// kernel: tpu_custom_call.1
$region0: #{tpu_custom_call.1}
  #allocation0 [shape = 'u32[]', space=smem, size = 0x4, offset = 0x4, fixed_abs, tag = 'smem constant byte address 0x4 - core index']
  #allocation1 [shape = 'u32[144,128]{1,0:T(1,128)}', space=vmem, size = 0x12000, scoped, tag = 'internal scratch']
  #allocation2 [shape = 'f32[256,128]{1,0:T(8,128)}', space=vmem, size = 0x20000, scoped, tag = 'scratch operand']
  %s0 = inlined_call_operand.vmem [shape: f32[256,100], index: 0, kind: input, shape index: {}]
  %s1 = inlined_call_operand.vmem [shape: bf16[128,128], index: 1, kind: input, shape index: {}]
  %s2 = inlined_call_operand.vmem [shape: f32[1,128], index: 2, kind: input, shape index: {}]
  %s3 = inlined_call_operand.vmem [shape: bf16[128,256], index: 3, kind: input, shape index: {}]
  %s4 = inlined_call_operand.vmem [shape: f32[1,256], index: 4, kind: input, shape index: {}]
  %s5 = inlined_call_operand.vmem [shape: f32[1,256], index: 5, kind: input, shape index: {}]
  %s6 = inlined_call_operand.vmem [shape: bf16[256,512], index: 6, kind: input, shape index: {}]
  %s7 = inlined_call_operand.vmem [shape: f32[1,512], index: 7, kind: input, shape index: {}]
  %s8 = inlined_call_operand.vmem [shape: f32[1,512], index: 8, kind: input, shape index: {}]
  %s9 = inlined_call_operand.vmem [shape: s8[512,1024], index: 9, kind: input, shape index: {}]
  %s10 = inlined_call_operand.vmem [shape: f32[1,1024], index: 10, kind: input, shape index: {}]
  %s11 = inlined_call_operand.vmem [shape: f32[1,1024], index: 11, kind: input, shape index: {}]
  %s12 = inlined_call_operand.vmem [shape: f32[1,1024], index: 12, kind: input, shape index: {}]
  %s13 = inlined_call_operand.vmem [shape: s8[1024,784], index: 13, kind: input, shape index: {}]
  %s14 = inlined_call_operand.vmem [shape: f32[1,784], index: 14, kind: input, shape index: {}]
  %s15 = inlined_call_operand.vmem [shape: f32[1,784], index: 15, kind: input, shape index: {}]
  %s16 = inlined_call_operand.vmem [shape: f32[256,784], index: 16, kind: output, shape index: {}]
  %s17 = sld [smem:[#allocation0]]
  $region74: #{tpu_custom_call.1} parent=0
    _
  %s19 = ssub.s32 1, %s17
  %s20 = scalar_select 0, %s19, %s17
  // Predicated region
  $region2: #{tpu_custom_call.1} parent=0 // pred_check
    _
  $region3: #{tpu_custom_call.1} parent=0 // pred_check_branch
    %22 = sbr.rel (0) target = $region5
  $region4: #{tpu_custom_call.1} parent=0 // pred_region
    _
  $region5: #{tpu_custom_call.1} parent=0 // pred_fallthru
    _
  // Predicated region
  $region6: #{tpu_custom_call.1} parent=0 // pred_check
    _
  $region7: #{tpu_custom_call.1} parent=0 // pred_check_branch
    %24 = sbr.rel (0) target = $region9
  $region8: #{tpu_custom_call.1} parent=0 // pred_region
    _
  $region9: #{tpu_custom_call.1} parent=0 // pred_fallthru
    _
  // Predicated region
  $region10: #{tpu_custom_call.1} parent=0 // pred_check
    _
  $region11: #{tpu_custom_call.1} parent=0 // pred_check_branch
    %26 = sbr.rel (0) target = $region13
  $region12: #{tpu_custom_call.1} parent=0 // pred_region
    _
  $region13: #{tpu_custom_call.1} parent=0 // pred_fallthru
    _
  // Predicated region
  $region14: #{tpu_custom_call.1} parent=0 // pred_check
    _
  $region15: #{tpu_custom_call.1} parent=0 // pred_check_branch
    %28 = sbr.rel (0) target = $region17
  $region16: #{tpu_custom_call.1} parent=0 // pred_region
    _
  $region17: #{tpu_custom_call.1} parent=0 // pred_fallthru
    _
  // Predicated region
  $region18: #{tpu_custom_call.1} parent=0 // pred_check
    _
  $region19: #{tpu_custom_call.1} parent=0 // pred_check_branch
    %30 = sbr.rel (0) target = $region21
  $region20: #{tpu_custom_call.1} parent=0 // pred_region
    _
  $region21: #{tpu_custom_call.1} parent=0 // pred_fallthru
    _
  // Predicated region
  $region22: #{tpu_custom_call.1} parent=0 // pred_check
    _
  $region23: #{tpu_custom_call.1} parent=0 // pred_check_branch
    %32 = sbr.rel (0) target = $region25
  $region24: #{tpu_custom_call.1} parent=0 // pred_region
    _
  $region25: #{tpu_custom_call.1} parent=0 // pred_fallthru
    _
  // Predicated region
  $region26: #{tpu_custom_call.1} parent=0 // pred_check
    _
  $region27: #{tpu_custom_call.1} parent=0 // pred_check_branch
    %34 = sbr.rel (0) target = $region29
  $region28: #{tpu_custom_call.1} parent=0 // pred_region
    _
  $region29: #{tpu_custom_call.1} parent=0 // pred_fallthru
    _
  // Predicated region
  $region30: #{tpu_custom_call.1} parent=0 // pred_check
    _
  $region31: #{tpu_custom_call.1} parent=0 // pred_check_branch
    %36 = sbr.rel (0) target = $region33
  $region32: #{tpu_custom_call.1} parent=0 // pred_region
    _
  $region33: #{tpu_custom_call.1} parent=0 // pred_fallthru
    _
  // Predicated region
  $region34: #{tpu_custom_call.1} parent=0 // pred_check
    _
  $region35: #{tpu_custom_call.1} parent=0 // pred_check_branch
    %38 = sbr.rel (0) target = $region37
  $region36: #{tpu_custom_call.1} parent=0 // pred_region
    _
  $region37: #{tpu_custom_call.1} parent=0 // pred_fallthru
    _
  // Predicated region
  $region38: #{tpu_custom_call.1} parent=0 // pred_check
    _
  $region39: #{tpu_custom_call.1} parent=0 // pred_check_branch
    %40 = sbr.rel (0) target = $region41
  $region40: #{tpu_custom_call.1} parent=0 // pred_region
    _
  $region41: #{tpu_custom_call.1} parent=0 // pred_fallthru
    _
  // Predicated region
  $region42: #{tpu_custom_call.1} parent=0 // pred_check
    _
  $region43: #{tpu_custom_call.1} parent=0 // pred_check_branch
    %42 = sbr.rel (0) target = $region45
  $region44: #{tpu_custom_call.1} parent=0 // pred_region
    _
  $region45: #{tpu_custom_call.1} parent=0 // pred_fallthru
    _
  // Predicated region
  $region46: #{tpu_custom_call.1} parent=0 // pred_check
    _
  $region47: #{tpu_custom_call.1} parent=0 // pred_check_branch
    %44 = sbr.rel (0) target = $region49
  $region48: #{tpu_custom_call.1} parent=0 // pred_region
    _
  $region49: #{tpu_custom_call.1} parent=0 // pred_fallthru
    _
  // Predicated region
  $region50: #{tpu_custom_call.1} parent=0 // pred_check
    _
  $region51: #{tpu_custom_call.1} parent=0 // pred_check_branch
    %46 = sbr.rel (0) target = $region53
  $region52: #{tpu_custom_call.1} parent=0 // pred_region
    _
  $region53: #{tpu_custom_call.1} parent=0 // pred_fallthru
    _
  // Predicated region
  $region54: #{tpu_custom_call.1} parent=0 // pred_check
    _
  $region55: #{tpu_custom_call.1} parent=0 // pred_check_branch
    %48 = sbr.rel (0) target = $region57
  $region56: #{tpu_custom_call.1} parent=0 // pred_region
    _
  $region57: #{tpu_custom_call.1} parent=0 // pred_fallthru
    _
  // Predicated region
  $region58: #{tpu_custom_call.1} parent=0 // pred_check
    _
  $region59: #{tpu_custom_call.1} parent=0 // pred_check_branch
    %50 = sbr.rel (0) target = $region61
  $region60: #{tpu_custom_call.1} parent=0 // pred_region
    _
  $region61: #{tpu_custom_call.1} parent=0 // pred_fallthru
    _
  // Predicated region
  $region62: #{tpu_custom_call.1} parent=0 // pred_check
    _
  $region63: #{tpu_custom_call.1} parent=0 // pred_check_branch
    %52 = sbr.rel (0) target = $region65
  $region64: #{tpu_custom_call.1} parent=0 // pred_region
    _
  $region65: #{tpu_custom_call.1} parent=0 // pred_fallthru
    _
  %54 = vst [vmem:[#allocation2] sm:$0xff] 0.0
  %55 = vst [vmem:[#allocation2 + $0x8] sm:$0xff] 0.0
  %56 = vst [vmem:[#allocation2 + $0x10] sm:$0xff] 0.0
  %57 = vst [vmem:[#allocation2 + $0x18] sm:$0xff] 0.0
  %58 = vst [vmem:[#allocation2 + $0x20] sm:$0xff] 0.0
  %59 = vst [vmem:[#allocation2 + $0x28] sm:$0xff] 0.0
  %60 = vst [vmem:[#allocation2 + $0x30] sm:$0xff] 0.0
  %61 = vst [vmem:[#allocation2 + $0x38] sm:$0xff] 0.0
  %62 = vst [vmem:[#allocation2 + $0x40] sm:$0xff] 0.0
  %63 = vst [vmem:[#allocation2 + $0x48] sm:$0xff] 0.0
  %64 = vst [vmem:[#allocation2 + $0x50] sm:$0xff] 0.0
  %65 = vst [vmem:[#allocation2 + $0x58] sm:$0xff] 0.0
  %66 = vst [vmem:[#allocation2 + $0x60] sm:$0xff] 0.0
  %67 = vst [vmem:[#allocation2 + $0x68] sm:$0xff] 0.0
  %68 = vst [vmem:[#allocation2 + $0x70] sm:$0xff] 0.0
  %69 = vst [vmem:[#allocation2 + $0x78] sm:$0xff] 0.0
  %70 = vst [vmem:[#allocation2 + $0x80] sm:$0xff] 0.0
  %71 = vst [vmem:[#allocation2 + $0x88] sm:$0xff] 0.0
  %72 = vst [vmem:[#allocation2 + $0x90] sm:$0xff] 0.0
  %73 = vst [vmem:[#allocation2 + $0x98] sm:$0xff] 0.0
  %74 = vst [vmem:[#allocation2 + $0xa0] sm:$0xff] 0.0
  %75 = vst [vmem:[#allocation2 + $0xa8] sm:$0xff] 0.0
  %76 = vst [vmem:[#allocation2 + $0xb0] sm:$0xff] 0.0
  %77 = vst [vmem:[#allocation2 + $0xb8] sm:$0xff] 0.0
  %78 = vst [vmem:[#allocation2 + $0xc0] sm:$0xff] 0.0
  %79 = vst [vmem:[#allocation2 + $0xc8] sm:$0xff] 0.0
  %80 = vst [vmem:[#allocation2 + $0xd0] sm:$0xff] 0.0
  %81 = vst [vmem:[#allocation2 + $0xd8] sm:$0xff] 0.0
  %82 = vst [vmem:[#allocation2 + $0xe0] sm:$0xff] 0.0
  %83 = vst [vmem:[#allocation2 + $0xe8] sm:$0xff] 0.0
  %84 = vst [vmem:[#allocation2 + $0xf0] sm:$0xff] 0.0
  %85 = vst [vmem:[#allocation2 + $0xf8] sm:$0xff] 0.0
  %v86 = vld [vmem:[%s0] sm:$0xff]
  %v87 = vld [vmem:[%s0 + $0x8] sm:$0xff]
  %v88 = vld [vmem:[%s0 + $0x10] sm:$0xff]
  %v89 = vld [vmem:[%s0 + $0x18] sm:$0xff]
  %v90 = vld [vmem:[%s0 + $0x20] sm:$0xff]
  %v91 = vld [vmem:[%s0 + $0x28] sm:$0xff]
  %v92 = vld [vmem:[%s0 + $0x30] sm:$0xff]
  %v93 = vld [vmem:[%s0 + $0x38] sm:$0xff]
  %v94 = vld [vmem:[%s0 + $0x40] sm:$0xff]
  %v95 = vld [vmem:[%s0 + $0x48] sm:$0xff]
  %v96 = vld [vmem:[%s0 + $0x50] sm:$0xff]
  %v97 = vld [vmem:[%s0 + $0x58] sm:$0xff]
  %v98 = vld [vmem:[%s0 + $0x60] sm:$0xff]
  %v99 = vld [vmem:[%s0 + $0x68] sm:$0xff]
  %v100 = vld [vmem:[%s0 + $0x70] sm:$0xff]
  %v101 = vld [vmem:[%s0 + $0x78] sm:$0xff]
  %v102 = vld [vmem:[%s0 + $0x80] sm:$0xff]
  %v103 = vld [vmem:[%s0 + $0x88] sm:$0xff]
  %v104 = vld [vmem:[%s0 + $0x90] sm:$0xff]
  %v105 = vld [vmem:[%s0 + $0x98] sm:$0xff]
  %v106 = vld [vmem:[%s0 + $0xa0] sm:$0xff]
  %v107 = vld [vmem:[%s0 + $0xa8] sm:$0xff]
  %v108 = vld [vmem:[%s0 + $0xb0] sm:$0xff]
  %v109 = vld [vmem:[%s0 + $0xb8] sm:$0xff]
  %v110 = vld [vmem:[%s0 + $0xc0] sm:$0xff]
  %v111 = vld [vmem:[%s0 + $0xc8] sm:$0xff]
  %v112 = vld [vmem:[%s0 + $0xd0] sm:$0xff]
  %v113 = vld [vmem:[%s0 + $0xd8] sm:$0xff]
  %v114 = vld [vmem:[%s0 + $0xe0] sm:$0xff]
  %v115 = vld [vmem:[%s0 + $0xe8] sm:$0xff]
  %v116 = vld [vmem:[%s0 + $0xf0] sm:$0xff]
  %v117 = vld [vmem:[%s0 + $0xf8] sm:$0xff]
  %vm118 = vcmask 818176
  %119 = vst.msk [vmem:[#allocation2] sm:$0xff] %vm118, %v86
  %120 = vst.msk [vmem:[#allocation2 + $0x8] sm:$0xff] %vm118, %v87
  %121 = vst.msk [vmem:[#allocation2 + $0x10] sm:$0xff] %vm118, %v88
  %122 = vst.msk [vmem:[#allocation2 + $0x18] sm:$0xff] %vm118, %v89
  %123 = vst.msk [vmem:[#allocation2 + $0x20] sm:$0xff] %vm118, %v90
  %124 = vst.msk [vmem:[#allocation2 + $0x28] sm:$0xff] %vm118, %v91
  %125 = vst.msk [vmem:[#allocation2 + $0x30] sm:$0xff] %vm118, %v92
  %126 = vst.msk [vmem:[#allocation2 + $0x38] sm:$0xff] %vm118, %v93
  %127 = vst.msk [vmem:[#allocation2 + $0x40] sm:$0xff] %vm118, %v94
  %128 = vst.msk [vmem:[#allocation2 + $0x48] sm:$0xff] %vm118, %v95
  %129 = vst.msk [vmem:[#allocation2 + $0x50] sm:$0xff] %vm118, %v96
  %130 = vst.msk [vmem:[#allocation2 + $0x58] sm:$0xff] %vm118, %v97
  %131 = vst.msk [vmem:[#allocation2 + $0x60] sm:$0xff] %vm118, %v98
  %132 = vst.msk [vmem:[#allocation2 + $0x68] sm:$0xff] %vm118, %v99
  %133 = vst.msk [vmem:[#allocation2 + $0x70] sm:$0xff] %vm118, %v100
  %134 = vst.msk [vmem:[#allocation2 + $0x78] sm:$0xff] %vm118, %v101
  %135 = vst.msk [vmem:[#allocation2 + $0x80] sm:$0xff] %vm118, %v102
  %136 = vst.msk [vmem:[#allocation2 + $0x88] sm:$0xff] %vm118, %v103
  %137 = vst.msk [vmem:[#allocation2 + $0x90] sm:$0xff] %vm118, %v104
  %138 = vst.msk [vmem:[#allocation2 + $0x98] sm:$0xff] %vm118, %v105
  %139 = vst.msk [vmem:[#allocation2 + $0xa0] sm:$0xff] %vm118, %v106
  %140 = vst.msk [vmem:[#allocation2 + $0xa8] sm:$0xff] %vm118, %v107
  %141 = vst.msk [vmem:[#allocation2 + $0xb0] sm:$0xff] %vm118, %v108
  %142 = vst.msk [vmem:[#allocation2 + $0xb8] sm:$0xff] %vm118, %v109
  %143 = vst.msk [vmem:[#allocation2 + $0xc0] sm:$0xff] %vm118, %v110
  %144 = vst.msk [vmem:[#allocation2 + $0xc8] sm:$0xff] %vm118, %v111
  %145 = vst.msk [vmem:[#allocation2 + $0xd0] sm:$0xff] %vm118, %v112
  %146 = vst.msk [vmem:[#allocation2 + $0xd8] sm:$0xff] %vm118, %v113
  %147 = vst.msk [vmem:[#allocation2 + $0xe0] sm:$0xff] %vm118, %v114
  %148 = vst.msk [vmem:[#allocation2 + $0xe8] sm:$0xff] %vm118, %v115
  %149 = vst.msk [vmem:[#allocation2 + $0xf0] sm:$0xff] %vm118, %v116
  %150 = vst.msk [vmem:[#allocation2 + $0xf8] sm:$0xff] %vm118, %v117
  %v151 = vld [vmem:[#allocation2] sm:$0xff]
  %v152 = vld [vmem:[#allocation2 + $0x8] sm:$0xff]
  %v153 = vld [vmem:[#allocation2 + $0x10] sm:$0xff]
  %v154 = vld [vmem:[#allocation2 + $0x18] sm:$0xff]
  %v155 = vld [vmem:[#allocation2 + $0x20] sm:$0xff]
  %v156 = vld [vmem:[#allocation2 + $0x28] sm:$0xff]
  %v157 = vld [vmem:[#allocation2 + $0x30] sm:$0xff]
  %v158 = vld [vmem:[#allocation2 + $0x38] sm:$0xff]
  %v159 = vld [vmem:[#allocation2 + $0x40] sm:$0xff]
  %v160 = vld [vmem:[#allocation2 + $0x48] sm:$0xff]
  %v161 = vld [vmem:[#allocation2 + $0x50] sm:$0xff]
  %v162 = vld [vmem:[#allocation2 + $0x58] sm:$0xff]
  %v163 = vld [vmem:[#allocation2 + $0x60] sm:$0xff]
  %v164 = vld [vmem:[#allocation2 + $0x68] sm:$0xff]
  %v165 = vld [vmem:[#allocation2 + $0x70] sm:$0xff]
  %v166 = vld [vmem:[#allocation2 + $0x78] sm:$0xff]
  %v167 = vld [vmem:[#allocation2 + $0x80] sm:$0xff]
  %v168 = vld [vmem:[#allocation2 + $0x88] sm:$0xff]
  %v169 = vld [vmem:[#allocation2 + $0x90] sm:$0xff]
  %v170 = vld [vmem:[#allocation2 + $0x98] sm:$0xff]
  %v171 = vld [vmem:[#allocation2 + $0xa0] sm:$0xff]
  %v172 = vld [vmem:[#allocation2 + $0xa8] sm:$0xff]
  %v173 = vld [vmem:[#allocation2 + $0xb0] sm:$0xff]
  %v174 = vld [vmem:[#allocation2 + $0xb8] sm:$0xff]
  %v175 = vld [vmem:[#allocation2 + $0xc0] sm:$0xff]
  %v176 = vld [vmem:[#allocation2 + $0xc8] sm:$0xff]
  %v177 = vld [vmem:[#allocation2 + $0xd0] sm:$0xff]
  %v178 = vld [vmem:[#allocation2 + $0xd8] sm:$0xff]
  %v179 = vld [vmem:[#allocation2 + $0xe0] sm:$0xff]
  %v180 = vld [vmem:[#allocation2 + $0xe8] sm:$0xff]
  %v181 = vld [vmem:[#allocation2 + $0xf0] sm:$0xff]
  %v182 = vld [vmem:[#allocation2 + $0xf8] sm:$0xff]
  %v183 = vpack.c.bf16 %v152, %v151
  %v184 = vpack.c.bf16 %v154, %v153
  %v185 = vpack.c.bf16 %v156, %v155
  %v186 = vpack.c.bf16 %v158, %v157
  %v187 = vpack.c.bf16 %v160, %v159
  %v188 = vpack.c.bf16 %v162, %v161
  %v189 = vpack.c.bf16 %v164, %v163
  %v190 = vpack.c.bf16 %v166, %v165
  %v191 = vpack.c.bf16 %v168, %v167
  %v192 = vpack.c.bf16 %v170, %v169
  %v193 = vpack.c.bf16 %v172, %v171
  %v194 = vpack.c.bf16 %v174, %v173
  %v195 = vpack.c.bf16 %v176, %v175
  %v196 = vpack.c.bf16 %v178, %v177
  %v197 = vpack.c.bf16 %v180, %v179
  %v198 = vpack.c.bf16 %v182, %v181
  %v199 = vld [vmem:[%s1] sm:$0xf]
  %v200 = vld [vmem:[%s1 + $0x4] sm:$0xf]
  %v201 = vld [vmem:[%s1 + $0x8] sm:$0xf]
  %v202 = vld [vmem:[%s1 + $0xc] sm:$0xf]
  %v203 = vld [vmem:[%s1 + $0x10] sm:$0xf]
  %v204 = vld [vmem:[%s1 + $0x14] sm:$0xf]
  %v205 = vld [vmem:[%s1 + $0x18] sm:$0xf]
  %v206 = vld [vmem:[%s1 + $0x1c] sm:$0xf]
  %v207 = vld [vmem:[%s1 + $0x20] sm:$0xf]
  %v208 = vld [vmem:[%s1 + $0x24] sm:$0xf]
  %v209 = vld [vmem:[%s1 + $0x28] sm:$0xf]
  %v210 = vld [vmem:[%s1 + $0x2c] sm:$0xf]
  %v211 = vld [vmem:[%s1 + $0x30] sm:$0xf]
  %v212 = vld [vmem:[%s1 + $0x34] sm:$0xf]
  %v213 = vld [vmem:[%s1 + $0x38] sm:$0xf]
  %v214 = vld [vmem:[%s1 + $0x3c] sm:$0xf]
  %v215 = vld [vmem:[%s2] sm:$0x1]
  %v217 = vlaneseq
  %v218 = vshrl.u32 %v217, 7
  %v219 = vsub.s32 0, %v218
  %v220 = vrot.slane %v215, %v219
  %v238 = vunpack.c.l.b16 %v199
  %v239 = vunpack.c.l.b16 %v200
  %v240 = vunpack.c.l.b16 %v201
  %v241 = vunpack.c.l.b16 %v202
  %v242 = vunpack.c.l.b16 %v203
  %v243 = vunpack.c.l.b16 %v204
  %v244 = vunpack.c.l.b16 %v205
  %v245 = vunpack.c.l.b16 %v206
  %v246 = vunpack.c.l.b16 %v207
  %v247 = vunpack.c.l.b16 %v208
  %v248 = vunpack.c.l.b16 %v209
  %v249 = vunpack.c.l.b16 %v210
  %v250 = vunpack.c.l.b16 %v211
  %v251 = vunpack.c.l.b16 %v212
  %v252 = vunpack.c.l.b16 %v213
  %v253 = vunpack.c.l.b16 %v214
  %v254 = vpack.c.b16 %v239, %v238
  %v255 = vpack.c.b16 %v241, %v240
  %v256 = vpack.c.b16 %v243, %v242
  %v257 = vpack.c.b16 %v245, %v244
  %v258 = vpack.c.b16 %v247, %v246
  %v259 = vpack.c.b16 %v249, %v248
  %v260 = vpack.c.b16 %v251, %v250
  %v261 = vpack.c.b16 %v253, %v252
  %270 = vmatprep.subr.bf16.mxu0 0
  %271 = vmatpush1.bf16.msra.mxu0 %v261
  %272 = vmatprep.subr.bf16.mxu0 0
  %273 = vmatpush1.bf16.msra.mxu0 %v260
  %274 = vmatprep.subr.bf16.mxu0 0
  %275 = vmatpush1.bf16.msra.mxu0 %v259
  %276 = vmatprep.subr.bf16.mxu0 0
  %277 = vmatpush1.bf16.msra.mxu0 %v258
  %278 = vmatprep.subr.bf16.mxu0 0
  %279 = vmatpush1.bf16.msra.mxu0 %v257
  %280 = vmatprep.subr.bf16.mxu0 0
  %281 = vmatpush1.bf16.msra.mxu0 %v256
  %282 = vmatprep.subr.bf16.mxu0 0
  %283 = vmatpush1.bf16.msra.mxu0 %v255
  %284 = vmatprep.subr.bf16.mxu0 0
  %285 = vmatpush1.bf16.msra.mxu0 %v254
  %286 = vmatprep.subr.bf16.mxu0 0
  %287 = vmatpush2.bf16.msra.mxu0 0
  %288 = vmatprep.subr.bf16.mxu0 0
  %289 = vmatpush2.bf16.msra.mxu0 0
  %290 = vmatprep.subr.bf16.mxu0 0
  %291 = vmatpush2.bf16.msra.mxu0 0
  %292 = vmatprep.subr.bf16.mxu0 0
  %293 = vmatpush2.bf16.msra.mxu0 0
  %294 = vmatprep.subr.bf16.mxu0 0
  %295 = vmatpush2.bf16.msra.mxu0 0
  %296 = vmatprep.subr.bf16.mxu0 0
  %297 = vmatpush2.bf16.msra.mxu0 0
  %298 = vmatprep.subr.bf16.mxu0 0
  %299 = vmatpush2.bf16.msra.mxu0 0
  %300 = vmatprep.subr.bf16.mxu0 0
  %301 = vmatpush2.bf16.msra.mxu0 0
  %302 = vmatprep.mubr.bf16.mxu0 0
  %303 = vmatmul.mubr.bf16.gmra.mxu0 %v183
  %v304 = vpop.f32.mrf.mxu0
  %v305 = vadd.f32 %v220, %v304
  %v306 = vpop.f32.mrf.mxu0
  %v307 = vpop.f32.mrf.mxu0
  %v308 = vadd.f32 %v220, %v307
  %v309 = vpop.f32.mrf.mxu0
  %310 = vmatprep.mubr.bf16.mxu0 0
  %311 = vmatmul.mubr.bf16.gmra.mxu0 %v184
  %v312 = vpop.f32.mrf.mxu0
  %v313 = vadd.f32 %v220, %v312
  %v314 = vpop.f32.mrf.mxu0
  %v315 = vpop.f32.mrf.mxu0
  %v316 = vadd.f32 %v220, %v315
  %v317 = vpop.f32.mrf.mxu0
  %318 = vmatprep.mubr.bf16.mxu0 0
  %319 = vmatmul.mubr.bf16.gmra.mxu0 %v185
  %v320 = vpop.f32.mrf.mxu0
  %v321 = vadd.f32 %v220, %v320
  %v322 = vpop.f32.mrf.mxu0
  %v323 = vpop.f32.mrf.mxu0
  %v324 = vadd.f32 %v220, %v323
  %v325 = vpop.f32.mrf.mxu0
  %326 = vmatprep.mubr.bf16.mxu0 0
  %327 = vmatmul.mubr.bf16.gmra.mxu0 %v186
  %v328 = vpop.f32.mrf.mxu0
  %v329 = vadd.f32 %v220, %v328
  %v330 = vpop.f32.mrf.mxu0
  %v331 = vpop.f32.mrf.mxu0
  %v332 = vadd.f32 %v220, %v331
  %v333 = vpop.f32.mrf.mxu0
  %334 = vmatprep.mubr.bf16.mxu0 0
  %335 = vmatmul.mubr.bf16.gmra.mxu0 %v187
  %v336 = vpop.f32.mrf.mxu0
  %v337 = vadd.f32 %v220, %v336
  %v338 = vpop.f32.mrf.mxu0
  %v339 = vpop.f32.mrf.mxu0
  %v340 = vadd.f32 %v220, %v339
  %v341 = vpop.f32.mrf.mxu0
  %342 = vmatprep.mubr.bf16.mxu0 0
  %343 = vmatmul.mubr.bf16.gmra.mxu0 %v188
  %v344 = vpop.f32.mrf.mxu0
  %v345 = vadd.f32 %v220, %v344
  %v346 = vpop.f32.mrf.mxu0
  %v347 = vpop.f32.mrf.mxu0
  %v348 = vadd.f32 %v220, %v347
  %v349 = vpop.f32.mrf.mxu0
  %350 = vmatprep.mubr.bf16.mxu0 0
  %351 = vmatmul.mubr.bf16.gmra.mxu0 %v189
  %v352 = vpop.f32.mrf.mxu0
  %v353 = vadd.f32 %v220, %v352
  %v354 = vpop.f32.mrf.mxu0
  %v355 = vpop.f32.mrf.mxu0
  %v356 = vadd.f32 %v220, %v355
  %v357 = vpop.f32.mrf.mxu0
  %358 = vmatprep.mubr.bf16.mxu0 0
  %359 = vmatmul.mubr.bf16.gmra.mxu0 %v190
  %v360 = vpop.f32.mrf.mxu0
  %v361 = vadd.f32 %v220, %v360
  %v362 = vpop.f32.mrf.mxu0
  %v363 = vpop.f32.mrf.mxu0
  %v364 = vadd.f32 %v220, %v363
  %v365 = vpop.f32.mrf.mxu0
  %366 = vmatprep.mubr.bf16.mxu0 0
  %367 = vmatmul.mubr.bf16.gmra.mxu0 %v191
  %v368 = vpop.f32.mrf.mxu0
  %v369 = vadd.f32 %v220, %v368
  %v370 = vpop.f32.mrf.mxu0
  %v371 = vpop.f32.mrf.mxu0
  %v372 = vadd.f32 %v220, %v371
  %v373 = vpop.f32.mrf.mxu0
  %374 = vmatprep.mubr.bf16.mxu0 0
  %375 = vmatmul.mubr.bf16.gmra.mxu0 %v192
  %v376 = vpop.f32.mrf.mxu0
  %v377 = vadd.f32 %v220, %v376
  %v378 = vpop.f32.mrf.mxu0
  %v379 = vpop.f32.mrf.mxu0
  %v380 = vadd.f32 %v220, %v379
  %v381 = vpop.f32.mrf.mxu0
  %382 = vmatprep.mubr.bf16.mxu0 0
  %383 = vmatmul.mubr.bf16.gmra.mxu0 %v193
  %v384 = vpop.f32.mrf.mxu0
  %v385 = vadd.f32 %v220, %v384
  %v386 = vpop.f32.mrf.mxu0
  %v387 = vpop.f32.mrf.mxu0
  %v388 = vadd.f32 %v220, %v387
  %v389 = vpop.f32.mrf.mxu0
  %390 = vmatprep.mubr.bf16.mxu0 0
  %391 = vmatmul.mubr.bf16.gmra.mxu0 %v194
  %v392 = vpop.f32.mrf.mxu0
  %v393 = vadd.f32 %v220, %v392
  %v394 = vpop.f32.mrf.mxu0
  %v395 = vpop.f32.mrf.mxu0
  %v396 = vadd.f32 %v220, %v395
  %v397 = vpop.f32.mrf.mxu0
  %398 = vmatprep.mubr.bf16.mxu0 0
  %399 = vmatmul.mubr.bf16.gmra.mxu0 %v195
  %v400 = vpop.f32.mrf.mxu0
  %v401 = vadd.f32 %v220, %v400
  %v402 = vpop.f32.mrf.mxu0
  %v403 = vpop.f32.mrf.mxu0
  %v404 = vadd.f32 %v220, %v403
  %v405 = vpop.f32.mrf.mxu0
  %406 = vmatprep.mubr.bf16.mxu0 0
  %407 = vmatmul.mubr.bf16.gmra.mxu0 %v196
  %v408 = vpop.f32.mrf.mxu0
  %v409 = vadd.f32 %v220, %v408
  %v410 = vpop.f32.mrf.mxu0
  %v411 = vpop.f32.mrf.mxu0
  %v412 = vadd.f32 %v220, %v411
  %v413 = vpop.f32.mrf.mxu0
  %414 = vmatprep.mubr.bf16.mxu0 0
  %415 = vmatmul.mubr.bf16.gmra.mxu0 %v197
  %v416 = vpop.f32.mrf.mxu0
  %v417 = vadd.f32 %v220, %v416
  %v418 = vpop.f32.mrf.mxu0
  %v419 = vpop.f32.mrf.mxu0
  %v420 = vadd.f32 %v220, %v419
  %v421 = vpop.f32.mrf.mxu0
  %422 = vmatprep.mubr.bf16.mxu0 0
  %423 = vmatmul.mubr.bf16.gmra.mxu0 %v198
  %v424 = vpop.f32.mrf.mxu0
  %v425 = vadd.f32 %v220, %v424
  %v426 = vpop.f32.mrf.mxu0
  %v427 = vpop.f32.mrf.mxu0
  %v428 = vadd.f32 %v220, %v427
  %v429 = vpop.f32.mrf.mxu0
  %430 = vdwg.mxu0
  %vm431 = vcmp.gt.f32.partialorder %v305, 0.0
  %vm432 = vcmp.gt.f32.partialorder %v308, 0.0
  %vm433 = vcmp.gt.f32.partialorder %v313, 0.0
  %vm434 = vcmp.gt.f32.partialorder %v316, 0.0
  %vm435 = vcmp.gt.f32.partialorder %v321, 0.0
  %vm436 = vcmp.gt.f32.partialorder %v324, 0.0
  %vm437 = vcmp.gt.f32.partialorder %v329, 0.0
  %vm438 = vcmp.gt.f32.partialorder %v332, 0.0
  %vm439 = vcmp.gt.f32.partialorder %v337, 0.0
  %vm440 = vcmp.gt.f32.partialorder %v340, 0.0
  %vm441 = vcmp.gt.f32.partialorder %v345, 0.0
  %vm442 = vcmp.gt.f32.partialorder %v348, 0.0
  %vm443 = vcmp.gt.f32.partialorder %v353, 0.0
  %vm444 = vcmp.gt.f32.partialorder %v356, 0.0
  %vm445 = vcmp.gt.f32.partialorder %v361, 0.0
  %vm446 = vcmp.gt.f32.partialorder %v364, 0.0
  %vm447 = vcmp.gt.f32.partialorder %v369, 0.0
  %vm448 = vcmp.gt.f32.partialorder %v372, 0.0
  %vm449 = vcmp.gt.f32.partialorder %v377, 0.0
  %vm450 = vcmp.gt.f32.partialorder %v380, 0.0
  %vm451 = vcmp.gt.f32.partialorder %v385, 0.0
  %vm452 = vcmp.gt.f32.partialorder %v388, 0.0
  %vm453 = vcmp.gt.f32.partialorder %v393, 0.0
  %vm454 = vcmp.gt.f32.partialorder %v396, 0.0
  %vm455 = vcmp.gt.f32.partialorder %v401, 0.0
  %vm456 = vcmp.gt.f32.partialorder %v404, 0.0
  %vm457 = vcmp.gt.f32.partialorder %v409, 0.0
  %vm458 = vcmp.gt.f32.partialorder %v412, 0.0
  %vm459 = vcmp.gt.f32.partialorder %v417, 0.0
  %vm460 = vcmp.gt.f32.partialorder %v420, 0.0
  %vm461 = vcmp.gt.f32.partialorder %v425, 0.0
  %vm462 = vcmp.gt.f32.partialorder %v428, 0.0
  %v463 = vmul.f32 %v305, 0.2
  %v464 = vmul.f32 %v308, 0.2
  %v465 = vmul.f32 %v313, 0.2
  %v466 = vmul.f32 %v316, 0.2
  %v467 = vmul.f32 %v321, 0.2
  %v468 = vmul.f32 %v324, 0.2
  %v469 = vmul.f32 %v329, 0.2
  %v470 = vmul.f32 %v332, 0.2
  %v471 = vmul.f32 %v337, 0.2
  %v472 = vmul.f32 %v340, 0.2
  %v473 = vmul.f32 %v345, 0.2
  %v474 = vmul.f32 %v348, 0.2
  %v475 = vmul.f32 %v353, 0.2
  %v476 = vmul.f32 %v356, 0.2
  %v477 = vmul.f32 %v361, 0.2
  %v478 = vmul.f32 %v364, 0.2
  %v479 = vmul.f32 %v369, 0.2
  %v480 = vmul.f32 %v372, 0.2
  %v481 = vmul.f32 %v377, 0.2
  %v482 = vmul.f32 %v380, 0.2
  %v483 = vmul.f32 %v385, 0.2
  %v484 = vmul.f32 %v388, 0.2
  %v485 = vmul.f32 %v393, 0.2
  %v486 = vmul.f32 %v396, 0.2
  %v487 = vmul.f32 %v401, 0.2
  %v488 = vmul.f32 %v404, 0.2
  %v489 = vmul.f32 %v409, 0.2
  %v490 = vmul.f32 %v412, 0.2
  %v491 = vmul.f32 %v417, 0.2
  %v492 = vmul.f32 %v420, 0.2
  %v493 = vmul.f32 %v425, 0.2
  %v494 = vmul.f32 %v428, 0.2
  %v495 = vsel %vm431, %v305, %v463
  %v496 = vsel %vm432, %v308, %v464
  %v497 = vsel %vm433, %v313, %v465
  %v498 = vsel %vm434, %v316, %v466
  %v499 = vsel %vm435, %v321, %v467
  %v500 = vsel %vm436, %v324, %v468
  %v501 = vsel %vm437, %v329, %v469
  %v502 = vsel %vm438, %v332, %v470
  %v503 = vsel %vm439, %v337, %v471
  %v504 = vsel %vm440, %v340, %v472
  %v505 = vsel %vm441, %v345, %v473
  %v506 = vsel %vm442, %v348, %v474
  %v507 = vsel %vm443, %v353, %v475
  %v508 = vsel %vm444, %v356, %v476
  %v509 = vsel %vm445, %v361, %v477
  %v510 = vsel %vm446, %v364, %v478
  %v511 = vsel %vm447, %v369, %v479
  %v512 = vsel %vm448, %v372, %v480
  %v513 = vsel %vm449, %v377, %v481
  %v514 = vsel %vm450, %v380, %v482
  %v515 = vsel %vm451, %v385, %v483
  %v516 = vsel %vm452, %v388, %v484
  %v517 = vsel %vm453, %v393, %v485
  %v518 = vsel %vm454, %v396, %v486
  %v519 = vsel %vm455, %v401, %v487
  %v520 = vsel %vm456, %v404, %v488
  %v521 = vsel %vm457, %v409, %v489
  %v522 = vsel %vm458, %v412, %v490
  %v523 = vsel %vm459, %v417, %v491
  %v524 = vsel %vm460, %v420, %v492
  %v525 = vsel %vm461, %v425, %v493
  %v526 = vsel %vm462, %v428, %v494
  %v527 = vpack.c.bf16 %v496, %v495
  %v528 = vpack.c.bf16 %v498, %v497
  %v529 = vpack.c.bf16 %v500, %v499
  %v530 = vpack.c.bf16 %v502, %v501
  %v531 = vpack.c.bf16 %v504, %v503
  %v532 = vpack.c.bf16 %v506, %v505
  %v533 = vpack.c.bf16 %v508, %v507
  %v534 = vpack.c.bf16 %v510, %v509
  %v535 = vpack.c.bf16 %v512, %v511
  %v536 = vpack.c.bf16 %v514, %v513
  %v537 = vpack.c.bf16 %v516, %v515
  %v538 = vpack.c.bf16 %v518, %v517
  %v539 = vpack.c.bf16 %v520, %v519
  %v540 = vpack.c.bf16 %v522, %v521
  %v541 = vpack.c.bf16 %v524, %v523
  %v542 = vpack.c.bf16 %v526, %v525
  %v543 = vld [vmem:[%s3] sm:$0xff]
  %v544 = vld [vmem:[%s3 + $0x8] sm:$0xff]
  %v545 = vld [vmem:[%s3 + $0x10] sm:$0xff]
  %v546 = vld [vmem:[%s3 + $0x18] sm:$0xff]
  %v547 = vld [vmem:[%s3 + $0x20] sm:$0xff]
  %v548 = vld [vmem:[%s3 + $0x28] sm:$0xff]
  %v549 = vld [vmem:[%s3 + $0x30] sm:$0xff]
  %v550 = vld [vmem:[%s3 + $0x38] sm:$0xff]
  %v551 = vld [vmem:[%s3 + $0x40] sm:$0xff]
  %v552 = vld [vmem:[%s3 + $0x48] sm:$0xff]
  %v553 = vld [vmem:[%s3 + $0x50] sm:$0xff]
  %v554 = vld [vmem:[%s3 + $0x58] sm:$0xff]
  %v555 = vld [vmem:[%s3 + $0x60] sm:$0xff]
  %v556 = vld [vmem:[%s3 + $0x68] sm:$0xff]
  %v557 = vld [vmem:[%s3 + $0x70] sm:$0xff]
  %v558 = vld [vmem:[%s3 + $0x78] sm:$0xff]
  %v575 = vunpack.c.l.b16 %v543
  %v576 = vunpack.c.h.b16 %v543
  %v577 = vunpack.c.l.b16 %v544
  %v578 = vunpack.c.h.b16 %v544
  %v579 = vunpack.c.l.b16 %v545
  %v580 = vunpack.c.h.b16 %v545
  %v581 = vunpack.c.l.b16 %v546
  %v582 = vunpack.c.h.b16 %v546
  %v583 = vunpack.c.l.b16 %v547
  %v584 = vunpack.c.h.b16 %v547
  %v585 = vunpack.c.l.b16 %v548
  %v586 = vunpack.c.h.b16 %v548
  %v587 = vunpack.c.l.b16 %v549
  %v588 = vunpack.c.h.b16 %v549
  %v589 = vunpack.c.l.b16 %v550
  %v590 = vunpack.c.h.b16 %v550
  %v591 = vunpack.c.l.b16 %v551
  %v592 = vunpack.c.h.b16 %v551
  %v593 = vunpack.c.l.b16 %v552
  %v594 = vunpack.c.h.b16 %v552
  %v595 = vunpack.c.l.b16 %v553
  %v596 = vunpack.c.h.b16 %v553
  %v597 = vunpack.c.l.b16 %v554
  %v598 = vunpack.c.h.b16 %v554
  %v599 = vunpack.c.l.b16 %v555
  %v600 = vunpack.c.h.b16 %v555
  %v601 = vunpack.c.l.b16 %v556
  %v602 = vunpack.c.h.b16 %v556
  %v603 = vunpack.c.l.b16 %v557
  %v604 = vunpack.c.h.b16 %v557
  %v605 = vunpack.c.l.b16 %v558
  %v606 = vunpack.c.h.b16 %v558
  %v607 = vpack.c.b16 %v577, %v575
  %v608 = vpack.c.b16 %v578, %v576
  %v609 = vpack.c.b16 %v581, %v579
  %v610 = vpack.c.b16 %v582, %v580
  %v611 = vpack.c.b16 %v585, %v583
  %v612 = vpack.c.b16 %v586, %v584
  %v613 = vpack.c.b16 %v589, %v587
  %v614 = vpack.c.b16 %v590, %v588
  %v615 = vpack.c.b16 %v593, %v591
  %v616 = vpack.c.b16 %v594, %v592
  %v617 = vpack.c.b16 %v597, %v595
  %v618 = vpack.c.b16 %v598, %v596
  %v619 = vpack.c.b16 %v601, %v599
  %v620 = vpack.c.b16 %v602, %v600
  %v621 = vpack.c.b16 %v605, %v603
  %v622 = vpack.c.b16 %v606, %v604
  %639 = vmatprep.subr.bf16.mxu0 %v622
  %640 = vmatpush1.bf16.msra.mxu0 %v621
  %641 = vmatprep.subr.bf16.mxu0 %v620
  %642 = vmatpush1.bf16.msra.mxu0 %v619
  %643 = vmatprep.subr.bf16.mxu0 %v618
  %644 = vmatpush1.bf16.msra.mxu0 %v617
  %645 = vmatprep.subr.bf16.mxu0 %v616
  %646 = vmatpush1.bf16.msra.mxu0 %v615
  %647 = vmatprep.subr.bf16.mxu0 %v614
  %648 = vmatpush1.bf16.msra.mxu0 %v613
  %649 = vmatprep.subr.bf16.mxu0 %v612
  %650 = vmatpush1.bf16.msra.mxu0 %v611
  %651 = vmatprep.subr.bf16.mxu0 %v610
  %652 = vmatpush1.bf16.msra.mxu0 %v609
  %653 = vmatprep.subr.bf16.mxu0 %v608
  %654 = vmatpush1.bf16.msra.mxu0 %v607
  %655 = vmatprep.subr.bf16.mxu0 0
  %656 = vmatpush2.bf16.msra.mxu0 0
  %657 = vmatprep.subr.bf16.mxu0 0
  %658 = vmatpush2.bf16.msra.mxu0 0
  %659 = vmatprep.subr.bf16.mxu0 0
  %660 = vmatpush2.bf16.msra.mxu0 0
  %661 = vmatprep.subr.bf16.mxu0 0
  %662 = vmatpush2.bf16.msra.mxu0 0
  %663 = vmatprep.subr.bf16.mxu0 0
  %664 = vmatpush2.bf16.msra.mxu0 0
  %665 = vmatprep.subr.bf16.mxu0 0
  %666 = vmatpush2.bf16.msra.mxu0 0
  %667 = vmatprep.subr.bf16.mxu0 0
  %668 = vmatpush2.bf16.msra.mxu0 0
  %669 = vmatprep.subr.bf16.mxu0 0
  %670 = vmatpush2.bf16.msra.mxu0 0
  %671 = vmatprep.mubr.bf16.mxu0 0
  %672 = vmatmul.mubr.bf16.gmra.mxu0 %v527
  %v673 = vpop.f32.mrf.mxu0
  %v674 = vadd.f32 0.0, %v673
  %v675 = vpop.f32.mrf.mxu0
  %v676 = vadd.f32 0.0, %v675
  %v677 = vpop.f32.mrf.mxu0
  %v678 = vadd.f32 0.0, %v677
  %v679 = vpop.f32.mrf.mxu0
  %v680 = vadd.f32 0.0, %v679
  %681 = vmatprep.mubr.bf16.mxu0 0
  %682 = vmatmul.mubr.bf16.gmra.mxu0 %v528
  %v683 = vpop.f32.mrf.mxu0
  %v684 = vadd.f32 0.0, %v683
  %v685 = vpop.f32.mrf.mxu0
  %v686 = vadd.f32 0.0, %v685
  %v687 = vpop.f32.mrf.mxu0
  %v688 = vadd.f32 0.0, %v687
  %v689 = vpop.f32.mrf.mxu0
  %v690 = vadd.f32 0.0, %v689
  %691 = vmatprep.mubr.bf16.mxu0 0
  %692 = vmatmul.mubr.bf16.gmra.mxu0 %v529
  %v693 = vpop.f32.mrf.mxu0
  %v694 = vadd.f32 0.0, %v693
  %v695 = vpop.f32.mrf.mxu0
  %v696 = vadd.f32 0.0, %v695
  %v697 = vpop.f32.mrf.mxu0
  %v698 = vadd.f32 0.0, %v697
  %v699 = vpop.f32.mrf.mxu0
  %v700 = vadd.f32 0.0, %v699
  %701 = vmatprep.mubr.bf16.mxu0 0
  %702 = vmatmul.mubr.bf16.gmra.mxu0 %v530
  %v703 = vpop.f32.mrf.mxu0
  %v704 = vadd.f32 0.0, %v703
  %v705 = vpop.f32.mrf.mxu0
  %v706 = vadd.f32 0.0, %v705
  %v707 = vpop.f32.mrf.mxu0
  %v708 = vadd.f32 0.0, %v707
  %v709 = vpop.f32.mrf.mxu0
  %v710 = vadd.f32 0.0, %v709
  %711 = vmatprep.mubr.bf16.mxu0 0
  %712 = vmatmul.mubr.bf16.gmra.mxu0 %v531
  %v713 = vpop.f32.mrf.mxu0
  %v714 = vadd.f32 0.0, %v713
  %v715 = vpop.f32.mrf.mxu0
  %v716 = vadd.f32 0.0, %v715
  %v717 = vpop.f32.mrf.mxu0
  %v718 = vadd.f32 0.0, %v717
  %v719 = vpop.f32.mrf.mxu0
  %v720 = vadd.f32 0.0, %v719
  %721 = vmatprep.mubr.bf16.mxu0 0
  %722 = vmatmul.mubr.bf16.gmra.mxu0 %v532
  %v723 = vpop.f32.mrf.mxu0
  %v724 = vadd.f32 0.0, %v723
  %v725 = vpop.f32.mrf.mxu0
  %v726 = vadd.f32 0.0, %v725
  %v727 = vpop.f32.mrf.mxu0
  %v728 = vadd.f32 0.0, %v727
  %v729 = vpop.f32.mrf.mxu0
  %v730 = vadd.f32 0.0, %v729
  %731 = vmatprep.mubr.bf16.mxu0 0
  %732 = vmatmul.mubr.bf16.gmra.mxu0 %v533
  %v733 = vpop.f32.mrf.mxu0
  %v734 = vadd.f32 0.0, %v733
  %v735 = vpop.f32.mrf.mxu0
  %v736 = vadd.f32 0.0, %v735
  %v737 = vpop.f32.mrf.mxu0
  %v738 = vadd.f32 0.0, %v737
  %v739 = vpop.f32.mrf.mxu0
  %v740 = vadd.f32 0.0, %v739
  %741 = vmatprep.mubr.bf16.mxu0 0
  %742 = vmatmul.mubr.bf16.gmra.mxu0 %v534
  %v743 = vpop.f32.mrf.mxu0
  %v744 = vadd.f32 0.0, %v743
  %v745 = vpop.f32.mrf.mxu0
  %v746 = vadd.f32 0.0, %v745
  %v747 = vpop.f32.mrf.mxu0
  %v748 = vadd.f32 0.0, %v747
  %v749 = vpop.f32.mrf.mxu0
  %v750 = vadd.f32 0.0, %v749
  %751 = vmatprep.mubr.bf16.mxu0 0
  %752 = vmatmul.mubr.bf16.gmra.mxu0 %v535
  %v753 = vpop.f32.mrf.mxu0
  %v754 = vadd.f32 0.0, %v753
  %v755 = vpop.f32.mrf.mxu0
  %v756 = vadd.f32 0.0, %v755
  %v757 = vpop.f32.mrf.mxu0
  %v758 = vadd.f32 0.0, %v757
  %v759 = vpop.f32.mrf.mxu0
  %v760 = vadd.f32 0.0, %v759
  %761 = vmatprep.mubr.bf16.mxu0 0
  %762 = vmatmul.mubr.bf16.gmra.mxu0 %v536
  %v763 = vpop.f32.mrf.mxu0
  %v764 = vadd.f32 0.0, %v763
  %v765 = vpop.f32.mrf.mxu0
  %v766 = vadd.f32 0.0, %v765
  %v767 = vpop.f32.mrf.mxu0
  %v768 = vadd.f32 0.0, %v767
  %v769 = vpop.f32.mrf.mxu0
  %v770 = vadd.f32 0.0, %v769
  %771 = vmatprep.mubr.bf16.mxu0 0
  %772 = vmatmul.mubr.bf16.gmra.mxu0 %v537
  %v773 = vpop.f32.mrf.mxu0
  %v774 = vadd.f32 0.0, %v773
  %v775 = vpop.f32.mrf.mxu0
  %v776 = vadd.f32 0.0, %v775
  %v777 = vpop.f32.mrf.mxu0
  %v778 = vadd.f32 0.0, %v777
  %v779 = vpop.f32.mrf.mxu0
  %v780 = vadd.f32 0.0, %v779
  %781 = vmatprep.mubr.bf16.mxu0 0
  %782 = vmatmul.mubr.bf16.gmra.mxu0 %v538
  %v783 = vpop.f32.mrf.mxu0
  %v784 = vadd.f32 0.0, %v783
  %v785 = vpop.f32.mrf.mxu0
  %v786 = vadd.f32 0.0, %v785
  %v787 = vpop.f32.mrf.mxu0
  %v788 = vadd.f32 0.0, %v787
  %v789 = vpop.f32.mrf.mxu0
  %v790 = vadd.f32 0.0, %v789
  %791 = vmatprep.mubr.bf16.mxu0 0
  %792 = vmatmul.mubr.bf16.gmra.mxu0 %v539
  %v793 = vpop.f32.mrf.mxu0
  %v794 = vadd.f32 0.0, %v793
  %v795 = vpop.f32.mrf.mxu0
  %v796 = vadd.f32 0.0, %v795
  %v797 = vpop.f32.mrf.mxu0
  %v798 = vadd.f32 0.0, %v797
  %v799 = vpop.f32.mrf.mxu0
  %v800 = vadd.f32 0.0, %v799
  %801 = vmatprep.mubr.bf16.mxu0 0
  %802 = vmatmul.mubr.bf16.gmra.mxu0 %v540
  %v803 = vpop.f32.mrf.mxu0
  %v804 = vadd.f32 0.0, %v803
  %v805 = vpop.f32.mrf.mxu0
  %v806 = vadd.f32 0.0, %v805
  %v807 = vpop.f32.mrf.mxu0
  %v808 = vadd.f32 0.0, %v807
  %v809 = vpop.f32.mrf.mxu0
  %v810 = vadd.f32 0.0, %v809
  %811 = vmatprep.mubr.bf16.mxu0 0
  %812 = vmatmul.mubr.bf16.gmra.mxu0 %v541
  %v813 = vpop.f32.mrf.mxu0
  %v814 = vadd.f32 0.0, %v813
  %v815 = vpop.f32.mrf.mxu0
  %v816 = vadd.f32 0.0, %v815
  %v817 = vpop.f32.mrf.mxu0
  %v818 = vadd.f32 0.0, %v817
  %v819 = vpop.f32.mrf.mxu0
  %v820 = vadd.f32 0.0, %v819
  %821 = vmatprep.mubr.bf16.mxu0 0
  %822 = vmatmul.mubr.bf16.gmra.mxu0 %v542
  %v823 = vpop.f32.mrf.mxu0
  %v824 = vadd.f32 0.0, %v823
  %v825 = vpop.f32.mrf.mxu0
  %v826 = vadd.f32 0.0, %v825
  %v827 = vpop.f32.mrf.mxu0
  %v828 = vadd.f32 0.0, %v827
  %v829 = vpop.f32.mrf.mxu0
  %v830 = vadd.f32 0.0, %v829
  %831 = vdwg.mxu0
  %v832 = vld [vmem:[%s4] sm:$0x3]
  %v833 = vld [vmem:[%s5] sm:$0x3]
  %v834 = vadd.f32 %v674, %v678
  %v835 = vadd.f32 %v834, %v684
  %v836 = vadd.f32 %v835, %v688
  %v837 = vadd.f32 %v836, %v694
  %v838 = vadd.f32 %v837, %v698
  %v839 = vadd.f32 %v838, %v704
  %v840 = vadd.f32 %v839, %v708
  %v841 = vadd.f32 %v840, %v714
  %v842 = vadd.f32 %v841, %v718
  %v843 = vadd.f32 %v842, %v724
  %v844 = vadd.f32 %v843, %v728
  %v845 = vadd.f32 %v844, %v734
  %v846 = vadd.f32 %v845, %v738
  %v847 = vadd.f32 %v846, %v744
  %v848 = vadd.f32 %v847, %v748
  %v849 = vadd.f32 %v848, %v754
  %v850 = vadd.f32 %v849, %v758
  %v851 = vadd.f32 %v850, %v764
  %v852 = vadd.f32 %v851, %v768
  %v853 = vadd.f32 %v852, %v774
  %v854 = vadd.f32 %v853, %v778
  %v855 = vadd.f32 %v854, %v784
  %v856 = vadd.f32 %v855, %v788
  %v857 = vadd.f32 %v856, %v794
  %v858 = vadd.f32 %v857, %v798
  %v859 = vadd.f32 %v858, %v804
  %v860 = vadd.f32 %v859, %v808
  %v861 = vadd.f32 %v860, %v814
  %v862 = vadd.f32 %v861, %v818
  %v863 = vadd.f32 %v862, %v824
  %v864 = vadd.f32 %v863, %v828
  %v865 = vrot.slane %v864, 4
  %v866 = vadd.f32 %v864, %v865
  %v867 = vrot.slane %v866, 2
  %v868 = vadd.f32 %v866, %v867
  %v869 = vrot.slane %v868, 1
  %v870 = vadd.f32 %v868, %v869
  %v871 = vadd.f32 %v676, %v680
  %v872 = vadd.f32 %v871, %v686
  %v873 = vadd.f32 %v872, %v690
  %v874 = vadd.f32 %v873, %v696
  %v875 = vadd.f32 %v874, %v700
  %v876 = vadd.f32 %v875, %v706
  %v877 = vadd.f32 %v876, %v710
  %v878 = vadd.f32 %v877, %v716
  %v879 = vadd.f32 %v878, %v720
  %v880 = vadd.f32 %v879, %v726
  %v881 = vadd.f32 %v880, %v730
  %v882 = vadd.f32 %v881, %v736
  %v883 = vadd.f32 %v882, %v740
  %v884 = vadd.f32 %v883, %v746
  %v885 = vadd.f32 %v884, %v750
  %v886 = vadd.f32 %v885, %v756
  %v887 = vadd.f32 %v886, %v760
  %v888 = vadd.f32 %v887, %v766
  %v889 = vadd.f32 %v888, %v770
  %v890 = vadd.f32 %v889, %v776
  %v891 = vadd.f32 %v890, %v780
  %v892 = vadd.f32 %v891, %v786
  %v893 = vadd.f32 %v892, %v790
  %v894 = vadd.f32 %v893, %v796
  %v895 = vadd.f32 %v894, %v800
  %v896 = vadd.f32 %v895, %v806
  %v897 = vadd.f32 %v896, %v810
  %v898 = vadd.f32 %v897, %v816
  %v899 = vadd.f32 %v898, %v820
  %v900 = vadd.f32 %v899, %v826
  %v901 = vadd.f32 %v900, %v830
  %v902 = vrot.slane %v901, 4
  %v903 = vadd.f32 %v901, %v902
  %v904 = vrot.slane %v903, 2
  %v905 = vadd.f32 %v903, %v904
  %v906 = vrot.slane %v905, 1
  %v907 = vadd.f32 %v905, %v906
  %v908 = vrcp.pop 256.0
  %v909 = vmul.f32 %v870, %v908
  %v910 = vmul.f32 %v907, %v908
  %v911 = vmul.f32 %v674, %v674
  %v912 = vmul.f32 %v676, %v676
  %v913 = vmul.f32 %v678, %v678
  %v914 = vmul.f32 %v680, %v680
  %v915 = vmul.f32 %v684, %v684
  %v916 = vmul.f32 %v686, %v686
  %v917 = vmul.f32 %v688, %v688
  %v918 = vmul.f32 %v690, %v690
  %v919 = vmul.f32 %v694, %v694
  %v920 = vmul.f32 %v696, %v696
  %v921 = vmul.f32 %v698, %v698
  %v922 = vmul.f32 %v700, %v700
  %v923 = vmul.f32 %v704, %v704
  %v924 = vmul.f32 %v706, %v706
  %v925 = vmul.f32 %v708, %v708
  %v926 = vmul.f32 %v710, %v710
  %v927 = vmul.f32 %v714, %v714
  %v928 = vmul.f32 %v716, %v716
  %v929 = vmul.f32 %v718, %v718
  %v930 = vmul.f32 %v720, %v720
  %v931 = vmul.f32 %v724, %v724
  %v932 = vmul.f32 %v726, %v726
  %v933 = vmul.f32 %v728, %v728
  %v934 = vmul.f32 %v730, %v730
  %v935 = vmul.f32 %v734, %v734
  %v936 = vmul.f32 %v736, %v736
  %v937 = vmul.f32 %v738, %v738
  %v938 = vmul.f32 %v740, %v740
  %v939 = vmul.f32 %v744, %v744
  %v940 = vmul.f32 %v746, %v746
  %v941 = vmul.f32 %v748, %v748
  %v942 = vmul.f32 %v750, %v750
  %v943 = vmul.f32 %v754, %v754
  %v944 = vmul.f32 %v756, %v756
  %v945 = vmul.f32 %v758, %v758
  %v946 = vmul.f32 %v760, %v760
  %v947 = vmul.f32 %v764, %v764
  %v948 = vmul.f32 %v766, %v766
  %v949 = vmul.f32 %v768, %v768
  %v950 = vmul.f32 %v770, %v770
  %v951 = vmul.f32 %v774, %v774
  %v952 = vmul.f32 %v776, %v776
  %v953 = vmul.f32 %v778, %v778
  %v954 = vmul.f32 %v780, %v780
  %v955 = vmul.f32 %v784, %v784
  %v956 = vmul.f32 %v786, %v786
  %v957 = vmul.f32 %v788, %v788
  %v958 = vmul.f32 %v790, %v790
  %v959 = vmul.f32 %v794, %v794
  %v960 = vmul.f32 %v796, %v796
  %v961 = vmul.f32 %v798, %v798
  %v962 = vmul.f32 %v800, %v800
  %v963 = vmul.f32 %v804, %v804
  %v964 = vmul.f32 %v806, %v806
  %v965 = vmul.f32 %v808, %v808
  %v966 = vmul.f32 %v810, %v810
  %v967 = vmul.f32 %v814, %v814
  %v968 = vmul.f32 %v816, %v816
  %v969 = vmul.f32 %v818, %v818
  %v970 = vmul.f32 %v820, %v820
  %v971 = vmul.f32 %v824, %v824
  %v972 = vmul.f32 %v826, %v826
  %v973 = vmul.f32 %v828, %v828
  %v974 = vmul.f32 %v830, %v830
  %v975 = vadd.f32 %v911, %v913
  %v976 = vadd.f32 %v975, %v915
  %v977 = vadd.f32 %v976, %v917
  %v978 = vadd.f32 %v977, %v919
  %v979 = vadd.f32 %v978, %v921
  %v980 = vadd.f32 %v979, %v923
  %v981 = vadd.f32 %v980, %v925
  %v982 = vadd.f32 %v981, %v927
  %v983 = vadd.f32 %v982, %v929
  %v984 = vadd.f32 %v983, %v931
  %v985 = vadd.f32 %v984, %v933
  %v986 = vadd.f32 %v985, %v935
  %v987 = vadd.f32 %v986, %v937
  %v988 = vadd.f32 %v987, %v939
  %v989 = vadd.f32 %v988, %v941
  %v990 = vadd.f32 %v989, %v943
  %v991 = vadd.f32 %v990, %v945
  %v992 = vadd.f32 %v991, %v947
  %v993 = vadd.f32 %v992, %v949
  %v994 = vadd.f32 %v993, %v951
  %v995 = vadd.f32 %v994, %v953
  %v996 = vadd.f32 %v995, %v955
  %v997 = vadd.f32 %v996, %v957
  %v998 = vadd.f32 %v997, %v959
  %v999 = vadd.f32 %v998, %v961
  %v1000 = vadd.f32 %v999, %v963
  %v1001 = vadd.f32 %v1000, %v965
  %v1002 = vadd.f32 %v1001, %v967
  %v1003 = vadd.f32 %v1002, %v969
  %v1004 = vadd.f32 %v1003, %v971
  %v1005 = vadd.f32 %v1004, %v973
  %v1006 = vrot.slane %v1005, 4
  %v1007 = vadd.f32 %v1005, %v1006
  %v1008 = vrot.slane %v1007, 2
  %v1009 = vadd.f32 %v1007, %v1008
  %v1010 = vrot.slane %v1009, 1
  %v1011 = vadd.f32 %v1009, %v1010
  %v1012 = vadd.f32 %v912, %v914
  %v1013 = vadd.f32 %v1012, %v916
  %v1014 = vadd.f32 %v1013, %v918
  %v1015 = vadd.f32 %v1014, %v920
  %v1016 = vadd.f32 %v1015, %v922
  %v1017 = vadd.f32 %v1016, %v924
  %v1018 = vadd.f32 %v1017, %v926
  %v1019 = vadd.f32 %v1018, %v928
  %v1020 = vadd.f32 %v1019, %v930
  %v1021 = vadd.f32 %v1020, %v932
  %v1022 = vadd.f32 %v1021, %v934
  %v1023 = vadd.f32 %v1022, %v936
  %v1024 = vadd.f32 %v1023, %v938
  %v1025 = vadd.f32 %v1024, %v940
  %v1026 = vadd.f32 %v1025, %v942
  %v1027 = vadd.f32 %v1026, %v944
  %v1028 = vadd.f32 %v1027, %v946
  %v1029 = vadd.f32 %v1028, %v948
  %v1030 = vadd.f32 %v1029, %v950
  %v1031 = vadd.f32 %v1030, %v952
  %v1032 = vadd.f32 %v1031, %v954
  %v1033 = vadd.f32 %v1032, %v956
  %v1034 = vadd.f32 %v1033, %v958
  %v1035 = vadd.f32 %v1034, %v960
  %v1036 = vadd.f32 %v1035, %v962
  %v1037 = vadd.f32 %v1036, %v964
  %v1038 = vadd.f32 %v1037, %v966
  %v1039 = vadd.f32 %v1038, %v968
  %v1040 = vadd.f32 %v1039, %v970
  %v1041 = vadd.f32 %v1040, %v972
  %v1042 = vadd.f32 %v1041, %v974
  %v1043 = vrot.slane %v1042, 4
  %v1044 = vadd.f32 %v1042, %v1043
  %v1045 = vrot.slane %v1044, 2
  %v1046 = vadd.f32 %v1044, %v1045
  %v1047 = vrot.slane %v1046, 1
  %v1048 = vadd.f32 %v1046, %v1047
  %v1049 = vmul.f32 %v1011, %v908
  %v1050 = vmul.f32 %v1048, %v908
  %v1051 = vmul.f32 %v909, %v909
  %v1052 = vmul.f32 %v910, %v910
  %v1053 = vsub.f32 %v1049, %v1051
  %v1054 = vsub.f32 %v1050, %v1052
  %v1055 = vmax.f32 %v1053, 0.0
  %v1056 = vmax.f32 %v1054, 0.0
  %v1057 = vadd.f32 %v1055, 1e-05
  %v1058 = vadd.f32 %v1056, 1e-05
  %v1059 = vrsqrt.pop %v1057
  %v1060 = vrsqrt.pop %v1058
  %v1063 = vcombine.low %v1059, %v1060
  %v1065 = vunpack.c.l.s4 1966171168
  %v1066 = vunpack.c.0.s8 %v1065
  %v1067 = vlaneseq
  %v1068 = vshrl.u32 %v1067, 7
  %v1069 = vsub.s32 %v1066, %v1068
  %v1070 = vrot.slane %v1063, %v1069
  %v1072 = vunpack.c.l.s4 1966171168
  %v1073 = vunpack.c.0.s8 %v1072
  %v1074 = vlaneseq
  %v1075 = vshrl.u32 %v1074, 7
  %v1076 = vsub.s32 %v1073, %v1075
  %v1077 = vrot.slane %v1070, %v1076
  %v1079 = vmul.f32 %v832, %v1077
  %v1081 = vlaneseq
  %v1082 = vshrl.u32 %v1081, 7
  %v1083 = vsub.s32 0, %v1082
  %v1084 = vrot.slane %v1079, %v1083
  %v1085 = vlaneseq
  %v1086 = vshrl.u32 %v1085, 7
  %v1087 = vsub.s32 1, %v1086
  %v1088 = vrot.slane %v1079, %v1087
  %v1091 = vmul.f32 %v909, %v1084
  %v1092 = vmul.f32 %v910, %v1088
  %v1095 = vcombine.low %v1091, %v1092
  %v1097 = vunpack.c.l.s4 1966171168
  %v1098 = vunpack.c.0.s8 %v1097
  %v1099 = vlaneseq
  %v1100 = vshrl.u32 %v1099, 7
  %v1101 = vsub.s32 %v1098, %v1100
  %v1102 = vrot.slane %v1095, %v1101
  %v1104 = vunpack.c.l.s4 1966171168
  %v1105 = vunpack.c.0.s8 %v1104
  %v1106 = vlaneseq
  %v1107 = vshrl.u32 %v1106, 7
  %v1108 = vsub.s32 %v1105, %v1107
  %v1109 = vrot.slane %v1102, %v1108
  %v1111 = vsub.f32 %v833, %v1109
  %v1112 = vmul.f32 %v674, %v1084
  %v1113 = vmul.f32 %v676, %v1088
  %v1114 = vmul.f32 %v678, %v1084
  %v1115 = vmul.f32 %v680, %v1088
  %v1116 = vmul.f32 %v684, %v1084
  %v1117 = vmul.f32 %v686, %v1088
  %v1118 = vmul.f32 %v688, %v1084
  %v1119 = vmul.f32 %v690, %v1088
  %v1120 = vmul.f32 %v694, %v1084
  %v1121 = vmul.f32 %v696, %v1088
  %v1122 = vmul.f32 %v698, %v1084
  %v1123 = vmul.f32 %v700, %v1088
  %v1124 = vmul.f32 %v704, %v1084
  %v1125 = vmul.f32 %v706, %v1088
  %v1126 = vmul.f32 %v708, %v1084
  %v1127 = vmul.f32 %v710, %v1088
  %v1128 = vmul.f32 %v714, %v1084
  %v1129 = vmul.f32 %v716, %v1088
  %v1130 = vmul.f32 %v718, %v1084
  %v1131 = vmul.f32 %v720, %v1088
  %v1132 = vmul.f32 %v724, %v1084
  %v1133 = vmul.f32 %v726, %v1088
  %v1134 = vmul.f32 %v728, %v1084
  %v1135 = vmul.f32 %v730, %v1088
  %v1136 = vmul.f32 %v734, %v1084
  %v1137 = vmul.f32 %v736, %v1088
  %v1138 = vmul.f32 %v738, %v1084
  %v1139 = vmul.f32 %v740, %v1088
  %v1140 = vmul.f32 %v744, %v1084
  %v1141 = vmul.f32 %v746, %v1088
  %v1142 = vmul.f32 %v748, %v1084
  %v1143 = vmul.f32 %v750, %v1088
  %v1144 = vmul.f32 %v754, %v1084
  %v1145 = vmul.f32 %v756, %v1088
  %v1146 = vmul.f32 %v758, %v1084
  %v1147 = vmul.f32 %v760, %v1088
  %v1148 = vmul.f32 %v764, %v1084
  %v1149 = vmul.f32 %v766, %v1088
  %v1150 = vmul.f32 %v768, %v1084
  %v1151 = vmul.f32 %v770, %v1088
  %v1152 = vmul.f32 %v774, %v1084
  %v1153 = vmul.f32 %v776, %v1088
  %v1154 = vmul.f32 %v778, %v1084
  %v1155 = vmul.f32 %v780, %v1088
  %v1156 = vmul.f32 %v784, %v1084
  %v1157 = vmul.f32 %v786, %v1088
  %v1158 = vmul.f32 %v788, %v1084
  %v1159 = vmul.f32 %v790, %v1088
  %v1160 = vmul.f32 %v794, %v1084
  %v1161 = vmul.f32 %v796, %v1088
  %v1162 = vmul.f32 %v798, %v1084
  %v1163 = vmul.f32 %v800, %v1088
  %v1164 = vmul.f32 %v804, %v1084
  %v1165 = vmul.f32 %v806, %v1088
  %v1166 = vmul.f32 %v808, %v1084
  %v1167 = vmul.f32 %v810, %v1088
  %v1168 = vmul.f32 %v814, %v1084
  %v1169 = vmul.f32 %v816, %v1088
  %v1170 = vmul.f32 %v818, %v1084
  %v1171 = vmul.f32 %v820, %v1088
  %v1172 = vmul.f32 %v824, %v1084
  %v1173 = vmul.f32 %v826, %v1088
  %v1174 = vmul.f32 %v828, %v1084
  %v1175 = vmul.f32 %v830, %v1088
  %v1177 = vlaneseq
  %v1178 = vshrl.u32 %v1177, 7
  %v1179 = vsub.s32 0, %v1178
  %v1180 = vrot.slane %v1111, %v1179
  %v1181 = vlaneseq
  %v1182 = vshrl.u32 %v1181, 7
  %v1183 = vsub.s32 1, %v1182
  %v1184 = vrot.slane %v1111, %v1183
  %v1187 = vadd.f32 %v1112, %v1180
  %v1188 = vadd.f32 %v1113, %v1184
  %v1189 = vadd.f32 %v1114, %v1180
  %v1190 = vadd.f32 %v1115, %v1184
  %v1191 = vadd.f32 %v1116, %v1180
  %v1192 = vadd.f32 %v1117, %v1184
  %v1193 = vadd.f32 %v1118, %v1180
  %v1194 = vadd.f32 %v1119, %v1184
  %v1195 = vadd.f32 %v1120, %v1180
  %v1196 = vadd.f32 %v1121, %v1184
  %v1197 = vadd.f32 %v1122, %v1180
  %v1198 = vadd.f32 %v1123, %v1184
  %v1199 = vadd.f32 %v1124, %v1180
  %v1200 = vadd.f32 %v1125, %v1184
  %v1201 = vadd.f32 %v1126, %v1180
  %v1202 = vadd.f32 %v1127, %v1184
  %v1203 = vadd.f32 %v1128, %v1180
  %v1204 = vadd.f32 %v1129, %v1184
  %v1205 = vadd.f32 %v1130, %v1180
  %v1206 = vadd.f32 %v1131, %v1184
  %v1207 = vadd.f32 %v1132, %v1180
  %v1208 = vadd.f32 %v1133, %v1184
  %v1209 = vadd.f32 %v1134, %v1180
  %v1210 = vadd.f32 %v1135, %v1184
  %v1211 = vadd.f32 %v1136, %v1180
  %v1212 = vadd.f32 %v1137, %v1184
  %v1213 = vadd.f32 %v1138, %v1180
  %v1214 = vadd.f32 %v1139, %v1184
  %v1215 = vadd.f32 %v1140, %v1180
  %v1216 = vadd.f32 %v1141, %v1184
  %v1217 = vadd.f32 %v1142, %v1180
  %v1218 = vadd.f32 %v1143, %v1184
  %v1219 = vadd.f32 %v1144, %v1180
  %v1220 = vadd.f32 %v1145, %v1184
  %v1221 = vadd.f32 %v1146, %v1180
  %v1222 = vadd.f32 %v1147, %v1184
  %v1223 = vadd.f32 %v1148, %v1180
  %v1224 = vadd.f32 %v1149, %v1184
  %v1225 = vadd.f32 %v1150, %v1180
  %v1226 = vadd.f32 %v1151, %v1184
  %v1227 = vadd.f32 %v1152, %v1180
  %v1228 = vadd.f32 %v1153, %v1184
  %v1229 = vadd.f32 %v1154, %v1180
  %v1230 = vadd.f32 %v1155, %v1184
  %v1231 = vadd.f32 %v1156, %v1180
  %v1232 = vadd.f32 %v1157, %v1184
  %v1233 = vadd.f32 %v1158, %v1180
  %v1234 = vadd.f32 %v1159, %v1184
  %v1235 = vadd.f32 %v1160, %v1180
  %v1236 = vadd.f32 %v1161, %v1184
  %v1237 = vadd.f32 %v1162, %v1180
  %v1238 = vadd.f32 %v1163, %v1184
  %v1239 = vadd.f32 %v1164, %v1180
  %v1240 = vadd.f32 %v1165, %v1184
  %v1241 = vadd.f32 %v1166, %v1180
  %v1242 = vadd.f32 %v1167, %v1184
  %v1243 = vadd.f32 %v1168, %v1180
  %v1244 = vadd.f32 %v1169, %v1184
  %v1245 = vadd.f32 %v1170, %v1180
  %v1246 = vadd.f32 %v1171, %v1184
  %v1247 = vadd.f32 %v1172, %v1180
  %v1248 = vadd.f32 %v1173, %v1184
  %v1249 = vadd.f32 %v1174, %v1180
  %v1250 = vadd.f32 %v1175, %v1184
  %vm1251 = vcmp.gt.f32.partialorder %v1187, 0.0
  %vm1252 = vcmp.gt.f32.partialorder %v1188, 0.0
  %vm1253 = vcmp.gt.f32.partialorder %v1189, 0.0
  %vm1254 = vcmp.gt.f32.partialorder %v1190, 0.0
  %vm1255 = vcmp.gt.f32.partialorder %v1191, 0.0
  %vm1256 = vcmp.gt.f32.partialorder %v1192, 0.0
  %vm1257 = vcmp.gt.f32.partialorder %v1193, 0.0
  %vm1258 = vcmp.gt.f32.partialorder %v1194, 0.0
  %vm1259 = vcmp.gt.f32.partialorder %v1195, 0.0
  %vm1260 = vcmp.gt.f32.partialorder %v1196, 0.0
  %vm1261 = vcmp.gt.f32.partialorder %v1197, 0.0
  %vm1262 = vcmp.gt.f32.partialorder %v1198, 0.0
  %vm1263 = vcmp.gt.f32.partialorder %v1199, 0.0
  %vm1264 = vcmp.gt.f32.partialorder %v1200, 0.0
  %vm1265 = vcmp.gt.f32.partialorder %v1201, 0.0
  %vm1266 = vcmp.gt.f32.partialorder %v1202, 0.0
  %vm1267 = vcmp.gt.f32.partialorder %v1203, 0.0
  %vm1268 = vcmp.gt.f32.partialorder %v1204, 0.0
  %vm1269 = vcmp.gt.f32.partialorder %v1205, 0.0
  %vm1270 = vcmp.gt.f32.partialorder %v1206, 0.0
  %vm1271 = vcmp.gt.f32.partialorder %v1207, 0.0
  %vm1272 = vcmp.gt.f32.partialorder %v1208, 0.0
  %vm1273 = vcmp.gt.f32.partialorder %v1209, 0.0
  %vm1274 = vcmp.gt.f32.partialorder %v1210, 0.0
  %vm1275 = vcmp.gt.f32.partialorder %v1211, 0.0
  %vm1276 = vcmp.gt.f32.partialorder %v1212, 0.0
  %vm1277 = vcmp.gt.f32.partialorder %v1213, 0.0
  %vm1278 = vcmp.gt.f32.partialorder %v1214, 0.0
  %vm1279 = vcmp.gt.f32.partialorder %v1215, 0.0
  %vm1280 = vcmp.gt.f32.partialorder %v1216, 0.0
  %vm1281 = vcmp.gt.f32.partialorder %v1217, 0.0
  %vm1282 = vcmp.gt.f32.partialorder %v1218, 0.0
  %vm1283 = vcmp.gt.f32.partialorder %v1219, 0.0
  %vm1284 = vcmp.gt.f32.partialorder %v1220, 0.0
  %vm1285 = vcmp.gt.f32.partialorder %v1221, 0.0
  %vm1286 = vcmp.gt.f32.partialorder %v1222, 0.0
  %vm1287 = vcmp.gt.f32.partialorder %v1223, 0.0
  %vm1288 = vcmp.gt.f32.partialorder %v1224, 0.0
  %vm1289 = vcmp.gt.f32.partialorder %v1225, 0.0
  %vm1290 = vcmp.gt.f32.partialorder %v1226, 0.0
  %vm1291 = vcmp.gt.f32.partialorder %v1227, 0.0
  %vm1292 = vcmp.gt.f32.partialorder %v1228, 0.0
  %vm1293 = vcmp.gt.f32.partialorder %v1229, 0.0
  %vm1294 = vcmp.gt.f32.partialorder %v1230, 0.0
  %vm1295 = vcmp.gt.f32.partialorder %v1231, 0.0
  %vm1296 = vcmp.gt.f32.partialorder %v1232, 0.0
  %vm1297 = vcmp.gt.f32.partialorder %v1233, 0.0
  %vm1298 = vcmp.gt.f32.partialorder %v1234, 0.0
  %vm1299 = vcmp.gt.f32.partialorder %v1235, 0.0
  %vm1300 = vcmp.gt.f32.partialorder %v1236, 0.0
  %vm1301 = vcmp.gt.f32.partialorder %v1237, 0.0
  %vm1302 = vcmp.gt.f32.partialorder %v1238, 0.0
  %vm1303 = vcmp.gt.f32.partialorder %v1239, 0.0
  %vm1304 = vcmp.gt.f32.partialorder %v1240, 0.0
  %vm1305 = vcmp.gt.f32.partialorder %v1241, 0.0
  %vm1306 = vcmp.gt.f32.partialorder %v1242, 0.0
  %vm1307 = vcmp.gt.f32.partialorder %v1243, 0.0
  %vm1308 = vcmp.gt.f32.partialorder %v1244, 0.0
  %vm1309 = vcmp.gt.f32.partialorder %v1245, 0.0
  %vm1310 = vcmp.gt.f32.partialorder %v1246, 0.0
  %vm1311 = vcmp.gt.f32.partialorder %v1247, 0.0
  %vm1312 = vcmp.gt.f32.partialorder %v1248, 0.0
  %vm1313 = vcmp.gt.f32.partialorder %v1249, 0.0
  %vm1314 = vcmp.gt.f32.partialorder %v1250, 0.0
  %v1315 = vmul.f32 %v1187, 0.2
  %v1316 = vmul.f32 %v1188, 0.2
  %v1317 = vmul.f32 %v1189, 0.2
  %v1318 = vmul.f32 %v1190, 0.2
  %v1319 = vmul.f32 %v1191, 0.2
  %v1320 = vmul.f32 %v1192, 0.2
  %v1321 = vmul.f32 %v1193, 0.2
  %v1322 = vmul.f32 %v1194, 0.2
  %v1323 = vmul.f32 %v1195, 0.2
  %v1324 = vmul.f32 %v1196, 0.2
  %v1325 = vmul.f32 %v1197, 0.2
  %v1326 = vmul.f32 %v1198, 0.2
  %v1327 = vmul.f32 %v1199, 0.2
  %v1328 = vmul.f32 %v1200, 0.2
  %v1329 = vmul.f32 %v1201, 0.2
  %v1330 = vmul.f32 %v1202, 0.2
  %v1331 = vmul.f32 %v1203, 0.2
  %v1332 = vmul.f32 %v1204, 0.2
  %v1333 = vmul.f32 %v1205, 0.2
  %v1334 = vmul.f32 %v1206, 0.2
  %v1335 = vmul.f32 %v1207, 0.2
  %v1336 = vmul.f32 %v1208, 0.2
  %v1337 = vmul.f32 %v1209, 0.2
  %v1338 = vmul.f32 %v1210, 0.2
  %v1339 = vmul.f32 %v1211, 0.2
  %v1340 = vmul.f32 %v1212, 0.2
  %v1341 = vmul.f32 %v1213, 0.2
  %v1342 = vmul.f32 %v1214, 0.2
  %v1343 = vmul.f32 %v1215, 0.2
  %v1344 = vmul.f32 %v1216, 0.2
  %v1345 = vmul.f32 %v1217, 0.2
  %v1346 = vmul.f32 %v1218, 0.2
  %v1347 = vmul.f32 %v1219, 0.2
  %v1348 = vmul.f32 %v1220, 0.2
  %v1349 = vmul.f32 %v1221, 0.2
  %v1350 = vmul.f32 %v1222, 0.2
  %v1351 = vmul.f32 %v1223, 0.2
  %v1352 = vmul.f32 %v1224, 0.2
  %v1353 = vmul.f32 %v1225, 0.2
  %v1354 = vmul.f32 %v1226, 0.2
  %v1355 = vmul.f32 %v1227, 0.2
  %v1356 = vmul.f32 %v1228, 0.2
  %v1357 = vmul.f32 %v1229, 0.2
  %v1358 = vmul.f32 %v1230, 0.2
  %v1359 = vmul.f32 %v1231, 0.2
  %v1360 = vmul.f32 %v1232, 0.2
  %v1361 = vmul.f32 %v1233, 0.2
  %v1362 = vmul.f32 %v1234, 0.2
  %v1363 = vmul.f32 %v1235, 0.2
  %v1364 = vmul.f32 %v1236, 0.2
  %v1365 = vmul.f32 %v1237, 0.2
  %v1366 = vmul.f32 %v1238, 0.2
  %v1367 = vmul.f32 %v1239, 0.2
  %v1368 = vmul.f32 %v1240, 0.2
  %v1369 = vmul.f32 %v1241, 0.2
  %v1370 = vmul.f32 %v1242, 0.2
  %v1371 = vmul.f32 %v1243, 0.2
  %v1372 = vmul.f32 %v1244, 0.2
  %v1373 = vmul.f32 %v1245, 0.2
  %v1374 = vmul.f32 %v1246, 0.2
  %v1375 = vmul.f32 %v1247, 0.2
  %v1376 = vmul.f32 %v1248, 0.2
  %v1377 = vmul.f32 %v1249, 0.2
  %v1378 = vmul.f32 %v1250, 0.2
  %v1379 = vsel %vm1251, %v1187, %v1315
  %v1380 = vsel %vm1252, %v1188, %v1316
  %v1381 = vsel %vm1253, %v1189, %v1317
  %v1382 = vsel %vm1254, %v1190, %v1318
  %v1383 = vsel %vm1255, %v1191, %v1319
  %v1384 = vsel %vm1256, %v1192, %v1320
  %v1385 = vsel %vm1257, %v1193, %v1321
  %v1386 = vsel %vm1258, %v1194, %v1322
  %v1387 = vsel %vm1259, %v1195, %v1323
  %v1388 = vsel %vm1260, %v1196, %v1324
  %v1389 = vsel %vm1261, %v1197, %v1325
  %v1390 = vsel %vm1262, %v1198, %v1326
  %v1391 = vsel %vm1263, %v1199, %v1327
  %v1392 = vsel %vm1264, %v1200, %v1328
  %v1393 = vsel %vm1265, %v1201, %v1329
  %v1394 = vsel %vm1266, %v1202, %v1330
  %v1395 = vsel %vm1267, %v1203, %v1331
  %v1396 = vsel %vm1268, %v1204, %v1332
  %v1397 = vsel %vm1269, %v1205, %v1333
  %v1398 = vsel %vm1270, %v1206, %v1334
  %v1399 = vsel %vm1271, %v1207, %v1335
  %v1400 = vsel %vm1272, %v1208, %v1336
  %v1401 = vsel %vm1273, %v1209, %v1337
  %v1402 = vsel %vm1274, %v1210, %v1338
  %v1403 = vsel %vm1275, %v1211, %v1339
  %v1404 = vsel %vm1276, %v1212, %v1340
  %v1405 = vsel %vm1277, %v1213, %v1341
  %v1406 = vsel %vm1278, %v1214, %v1342
  %v1407 = vsel %vm1279, %v1215, %v1343
  %v1408 = vsel %vm1280, %v1216, %v1344
  %v1409 = vsel %vm1281, %v1217, %v1345
  %v1410 = vsel %vm1282, %v1218, %v1346
  %v1411 = vsel %vm1283, %v1219, %v1347
  %v1412 = vsel %vm1284, %v1220, %v1348
  %v1413 = vsel %vm1285, %v1221, %v1349
  %v1414 = vsel %vm1286, %v1222, %v1350
  %v1415 = vsel %vm1287, %v1223, %v1351
  %v1416 = vsel %vm1288, %v1224, %v1352
  %v1417 = vsel %vm1289, %v1225, %v1353
  %v1418 = vsel %vm1290, %v1226, %v1354
  %v1419 = vsel %vm1291, %v1227, %v1355
  %v1420 = vsel %vm1292, %v1228, %v1356
  %v1421 = vsel %vm1293, %v1229, %v1357
  %v1422 = vsel %vm1294, %v1230, %v1358
  %v1423 = vsel %vm1295, %v1231, %v1359
  %v1424 = vsel %vm1296, %v1232, %v1360
  %v1425 = vsel %vm1297, %v1233, %v1361
  %v1426 = vsel %vm1298, %v1234, %v1362
  %v1427 = vsel %vm1299, %v1235, %v1363
  %v1428 = vsel %vm1300, %v1236, %v1364
  %v1429 = vsel %vm1301, %v1237, %v1365
  %v1430 = vsel %vm1302, %v1238, %v1366
  %v1431 = vsel %vm1303, %v1239, %v1367
  %v1432 = vsel %vm1304, %v1240, %v1368
  %v1433 = vsel %vm1305, %v1241, %v1369
  %v1434 = vsel %vm1306, %v1242, %v1370
  %v1435 = vsel %vm1307, %v1243, %v1371
  %v1436 = vsel %vm1308, %v1244, %v1372
  %v1437 = vsel %vm1309, %v1245, %v1373
  %v1438 = vsel %vm1310, %v1246, %v1374
  %v1439 = vsel %vm1311, %v1247, %v1375
  %v1440 = vsel %vm1312, %v1248, %v1376
  %v1441 = vsel %vm1313, %v1249, %v1377
  %v1442 = vsel %vm1314, %v1250, %v1378
  %v1443 = vpack.c.bf16 %v1381, %v1379
  %v1444 = vpack.c.bf16 %v1382, %v1380
  %v1445 = vpack.c.bf16 %v1385, %v1383
  %v1446 = vpack.c.bf16 %v1386, %v1384
  %v1447 = vpack.c.bf16 %v1389, %v1387
  %v1448 = vpack.c.bf16 %v1390, %v1388
  %v1449 = vpack.c.bf16 %v1393, %v1391
  %v1450 = vpack.c.bf16 %v1394, %v1392
  %v1451 = vpack.c.bf16 %v1397, %v1395
  %v1452 = vpack.c.bf16 %v1398, %v1396
  %v1453 = vpack.c.bf16 %v1401, %v1399
  %v1454 = vpack.c.bf16 %v1402, %v1400
  %v1455 = vpack.c.bf16 %v1405, %v1403
  %v1456 = vpack.c.bf16 %v1406, %v1404
  %v1457 = vpack.c.bf16 %v1409, %v1407
  %v1458 = vpack.c.bf16 %v1410, %v1408
  %v1459 = vpack.c.bf16 %v1413, %v1411
  %v1460 = vpack.c.bf16 %v1414, %v1412
  %v1461 = vpack.c.bf16 %v1417, %v1415
  %v1462 = vpack.c.bf16 %v1418, %v1416
  %v1463 = vpack.c.bf16 %v1421, %v1419
  %v1464 = vpack.c.bf16 %v1422, %v1420
  %v1465 = vpack.c.bf16 %v1425, %v1423
  %v1466 = vpack.c.bf16 %v1426, %v1424
  %v1467 = vpack.c.bf16 %v1429, %v1427
  %v1468 = vpack.c.bf16 %v1430, %v1428
  %v1469 = vpack.c.bf16 %v1433, %v1431
  %v1470 = vpack.c.bf16 %v1434, %v1432
  %v1471 = vpack.c.bf16 %v1437, %v1435
  %v1472 = vpack.c.bf16 %v1438, %v1436
  %v1473 = vpack.c.bf16 %v1441, %v1439
  %v1474 = vpack.c.bf16 %v1442, %v1440
  %v1475 = vld [vmem:[%s6] sm:$0xff]
  %v1476 = vld [vmem:[%s6 + $0x8] sm:$0xff]
  %v1477 = vld [vmem:[%s6 + $0x10] sm:$0xff]
  %v1478 = vld [vmem:[%s6 + $0x18] sm:$0xff]
  %v1479 = vld [vmem:[%s6 + $0x20] sm:$0xff]
  %v1480 = vld [vmem:[%s6 + $0x28] sm:$0xff]
  %v1481 = vld [vmem:[%s6 + $0x30] sm:$0xff]
  %v1482 = vld [vmem:[%s6 + $0x38] sm:$0xff]
  %v1483 = vld [vmem:[%s6 + $0x40] sm:$0xff]
  %v1484 = vld [vmem:[%s6 + $0x48] sm:$0xff]
  %v1485 = vld [vmem:[%s6 + $0x50] sm:$0xff]
  %v1486 = vld [vmem:[%s6 + $0x58] sm:$0xff]
  %v1487 = vld [vmem:[%s6 + $0x60] sm:$0xff]
  %v1488 = vld [vmem:[%s6 + $0x68] sm:$0xff]
  %v1489 = vld [vmem:[%s6 + $0x70] sm:$0xff]
  %v1490 = vld [vmem:[%s6 + $0x78] sm:$0xff]
  %v1491 = vld [vmem:[%s6 + $0x80] sm:$0xff]
  %v1492 = vld [vmem:[%s6 + $0x88] sm:$0xff]
  %v1493 = vld [vmem:[%s6 + $0x90] sm:$0xff]
  %v1494 = vld [vmem:[%s6 + $0x98] sm:$0xff]
  %v1495 = vld [vmem:[%s6 + $0xa0] sm:$0xff]
  %v1496 = vld [vmem:[%s6 + $0xa8] sm:$0xff]
  %v1497 = vld [vmem:[%s6 + $0xb0] sm:$0xff]
  %v1498 = vld [vmem:[%s6 + $0xb8] sm:$0xff]
  %v1499 = vld [vmem:[%s6 + $0xc0] sm:$0xff]
  %v1500 = vld [vmem:[%s6 + $0xc8] sm:$0xff]
  %v1501 = vld [vmem:[%s6 + $0xd0] sm:$0xff]
  %v1502 = vld [vmem:[%s6 + $0xd8] sm:$0xff]
  %v1503 = vld [vmem:[%s6 + $0xe0] sm:$0xff]
  %v1504 = vld [vmem:[%s6 + $0xe8] sm:$0xff]
  %v1505 = vld [vmem:[%s6 + $0xf0] sm:$0xff]
  %v1506 = vld [vmem:[%s6 + $0xf8] sm:$0xff]
  %v1507 = vld [vmem:[%s6 + $0x100] sm:$0xff]
  %v1508 = vld [vmem:[%s6 + $0x108] sm:$0xff]
  %v1509 = vld [vmem:[%s6 + $0x110] sm:$0xff]
  %v1510 = vld [vmem:[%s6 + $0x118] sm:$0xff]
  %v1511 = vld [vmem:[%s6 + $0x120] sm:$0xff]
  %v1512 = vld [vmem:[%s6 + $0x128] sm:$0xff]
  %v1513 = vld [vmem:[%s6 + $0x130] sm:$0xff]
  %v1514 = vld [vmem:[%s6 + $0x138] sm:$0xff]
  %v1515 = vld [vmem:[%s6 + $0x140] sm:$0xff]
  %v1516 = vld [vmem:[%s6 + $0x148] sm:$0xff]
  %v1517 = vld [vmem:[%s6 + $0x150] sm:$0xff]
  %v1518 = vld [vmem:[%s6 + $0x158] sm:$0xff]
  %v1519 = vld [vmem:[%s6 + $0x160] sm:$0xff]
  %v1520 = vld [vmem:[%s6 + $0x168] sm:$0xff]
  %v1521 = vld [vmem:[%s6 + $0x170] sm:$0xff]
  %v1522 = vld [vmem:[%s6 + $0x178] sm:$0xff]
  %v1523 = vld [vmem:[%s6 + $0x180] sm:$0xff]
  %v1524 = vld [vmem:[%s6 + $0x188] sm:$0xff]
  %v1525 = vld [vmem:[%s6 + $0x190] sm:$0xff]
  %v1526 = vld [vmem:[%s6 + $0x198] sm:$0xff]
  %v1527 = vld [vmem:[%s6 + $0x1a0] sm:$0xff]
  %v1528 = vld [vmem:[%s6 + $0x1a8] sm:$0xff]
  %v1529 = vld [vmem:[%s6 + $0x1b0] sm:$0xff]
  %v1530 = vld [vmem:[%s6 + $0x1b8] sm:$0xff]
  %v1531 = vld [vmem:[%s6 + $0x1c0] sm:$0xff]
  %v1532 = vld [vmem:[%s6 + $0x1c8] sm:$0xff]
  %v1533 = vld [vmem:[%s6 + $0x1d0] sm:$0xff]
  %v1534 = vld [vmem:[%s6 + $0x1d8] sm:$0xff]
  %v1535 = vld [vmem:[%s6 + $0x1e0] sm:$0xff]
  %v1536 = vld [vmem:[%s6 + $0x1e8] sm:$0xff]
  %v1537 = vld [vmem:[%s6 + $0x1f0] sm:$0xff]
  %v1538 = vld [vmem:[%s6 + $0x1f8] sm:$0xff]
  %v1603 = vunpack.c.l.b16 %v1475
  %v1604 = vunpack.c.h.b16 %v1475
  %v1605 = vunpack.c.l.b16 %v1476
  %v1606 = vunpack.c.h.b16 %v1476
  %v1607 = vunpack.c.l.b16 %v1477
  %v1608 = vunpack.c.h.b16 %v1477
  %v1609 = vunpack.c.l.b16 %v1478
  %v1610 = vunpack.c.h.b16 %v1478
  %v1611 = vunpack.c.l.b16 %v1479
  %v1612 = vunpack.c.h.b16 %v1479
  %v1613 = vunpack.c.l.b16 %v1480
  %v1614 = vunpack.c.h.b16 %v1480
  %v1615 = vunpack.c.l.b16 %v1481
  %v1616 = vunpack.c.h.b16 %v1481
  %v1617 = vunpack.c.l.b16 %v1482
  %v1618 = vunpack.c.h.b16 %v1482
  %v1619 = vunpack.c.l.b16 %v1483
  %v1620 = vunpack.c.h.b16 %v1483
  %v1621 = vunpack.c.l.b16 %v1484
  %v1622 = vunpack.c.h.b16 %v1484
  %v1623 = vunpack.c.l.b16 %v1485
  %v1624 = vunpack.c.h.b16 %v1485
  %v1625 = vunpack.c.l.b16 %v1486
  %v1626 = vunpack.c.h.b16 %v1486
  %v1627 = vunpack.c.l.b16 %v1487
  %v1628 = vunpack.c.h.b16 %v1487
  %v1629 = vunpack.c.l.b16 %v1488
  %v1630 = vunpack.c.h.b16 %v1488
  %v1631 = vunpack.c.l.b16 %v1489
  %v1632 = vunpack.c.h.b16 %v1489
  %v1633 = vunpack.c.l.b16 %v1490
  %v1634 = vunpack.c.h.b16 %v1490
  %v1635 = vunpack.c.l.b16 %v1491
  %v1636 = vunpack.c.h.b16 %v1491
  %v1637 = vunpack.c.l.b16 %v1492
  %v1638 = vunpack.c.h.b16 %v1492
  %v1639 = vunpack.c.l.b16 %v1493
  %v1640 = vunpack.c.h.b16 %v1493
  %v1641 = vunpack.c.l.b16 %v1494
  %v1642 = vunpack.c.h.b16 %v1494
  %v1643 = vunpack.c.l.b16 %v1495
  %v1644 = vunpack.c.h.b16 %v1495
  %v1645 = vunpack.c.l.b16 %v1496
  %v1646 = vunpack.c.h.b16 %v1496
  %v1647 = vunpack.c.l.b16 %v1497
  %v1648 = vunpack.c.h.b16 %v1497
  %v1649 = vunpack.c.l.b16 %v1498
  %v1650 = vunpack.c.h.b16 %v1498
  %v1651 = vunpack.c.l.b16 %v1499
  %v1652 = vunpack.c.h.b16 %v1499
  %v1653 = vunpack.c.l.b16 %v1500
  %v1654 = vunpack.c.h.b16 %v1500
  %v1655 = vunpack.c.l.b16 %v1501
  %v1656 = vunpack.c.h.b16 %v1501
  %v1657 = vunpack.c.l.b16 %v1502
  %v1658 = vunpack.c.h.b16 %v1502
  %v1659 = vunpack.c.l.b16 %v1503
  %v1660 = vunpack.c.h.b16 %v1503
  %v1661 = vunpack.c.l.b16 %v1504
  %v1662 = vunpack.c.h.b16 %v1504
  %v1663 = vunpack.c.l.b16 %v1505
  %v1664 = vunpack.c.h.b16 %v1505
  %v1665 = vunpack.c.l.b16 %v1506
  %v1666 = vunpack.c.h.b16 %v1506
  %v1667 = vunpack.c.l.b16 %v1507
  %v1668 = vunpack.c.h.b16 %v1507
  %v1669 = vunpack.c.l.b16 %v1508
  %v1670 = vunpack.c.h.b16 %v1508
  %v1671 = vunpack.c.l.b16 %v1509
  %v1672 = vunpack.c.h.b16 %v1509
  %v1673 = vunpack.c.l.b16 %v1510
  %v1674 = vunpack.c.h.b16 %v1510
  %v1675 = vunpack.c.l.b16 %v1511
  %v1676 = vunpack.c.h.b16 %v1511
  %v1677 = vunpack.c.l.b16 %v1512
  %v1678 = vunpack.c.h.b16 %v1512
  %v1679 = vunpack.c.l.b16 %v1513
  %v1680 = vunpack.c.h.b16 %v1513
  %v1681 = vunpack.c.l.b16 %v1514
  %v1682 = vunpack.c.h.b16 %v1514
  %v1683 = vunpack.c.l.b16 %v1515
  %v1684 = vunpack.c.h.b16 %v1515
  %v1685 = vunpack.c.l.b16 %v1516
  %v1686 = vunpack.c.h.b16 %v1516
  %v1687 = vunpack.c.l.b16 %v1517
  %v1688 = vunpack.c.h.b16 %v1517
  %v1689 = vunpack.c.l.b16 %v1518
  %v1690 = vunpack.c.h.b16 %v1518
  %v1691 = vunpack.c.l.b16 %v1519
  %v1692 = vunpack.c.h.b16 %v1519
  %v1693 = vunpack.c.l.b16 %v1520
  %v1694 = vunpack.c.h.b16 %v1520
  %v1695 = vunpack.c.l.b16 %v1521
  %v1696 = vunpack.c.h.b16 %v1521
  %v1697 = vunpack.c.l.b16 %v1522
  %v1698 = vunpack.c.h.b16 %v1522
  %v1699 = vunpack.c.l.b16 %v1523
  %v1700 = vunpack.c.h.b16 %v1523
  %v1701 = vunpack.c.l.b16 %v1524
  %v1702 = vunpack.c.h.b16 %v1524
  %v1703 = vunpack.c.l.b16 %v1525
  %v1704 = vunpack.c.h.b16 %v1525
  %v1705 = vunpack.c.l.b16 %v1526
  %v1706 = vunpack.c.h.b16 %v1526
  %v1707 = vunpack.c.l.b16 %v1527
  %v1708 = vunpack.c.h.b16 %v1527
  %v1709 = vunpack.c.l.b16 %v1528
  %v1710 = vunpack.c.h.b16 %v1528
  %v1711 = vunpack.c.l.b16 %v1529
  %v1712 = vunpack.c.h.b16 %v1529
  %v1713 = vunpack.c.l.b16 %v1530
  %v1714 = vunpack.c.h.b16 %v1530
  %v1715 = vunpack.c.l.b16 %v1531
  %v1716 = vunpack.c.h.b16 %v1531
  %v1717 = vunpack.c.l.b16 %v1532
  %v1718 = vunpack.c.h.b16 %v1532
  %v1719 = vunpack.c.l.b16 %v1533
  %v1720 = vunpack.c.h.b16 %v1533
  %v1721 = vunpack.c.l.b16 %v1534
  %v1722 = vunpack.c.h.b16 %v1534
  %v1723 = vunpack.c.l.b16 %v1535
  %v1724 = vunpack.c.h.b16 %v1535
  %v1725 = vunpack.c.l.b16 %v1536
  %v1726 = vunpack.c.h.b16 %v1536
  %v1727 = vunpack.c.l.b16 %v1537
  %v1728 = vunpack.c.h.b16 %v1537
  %v1729 = vunpack.c.l.b16 %v1538
  %v1730 = vunpack.c.h.b16 %v1538
  %v1731 = vpack.c.b16 %v1607, %v1603
  %v1732 = vpack.c.b16 %v1608, %v1604
  %v1733 = vpack.c.b16 %v1609, %v1605
  %v1734 = vpack.c.b16 %v1610, %v1606
  %v1735 = vpack.c.b16 %v1615, %v1611
  %v1736 = vpack.c.b16 %v1616, %v1612
  %v1737 = vpack.c.b16 %v1617, %v1613
  %v1738 = vpack.c.b16 %v1618, %v1614
  %v1739 = vpack.c.b16 %v1623, %v1619
  %v1740 = vpack.c.b16 %v1624, %v1620
  %v1741 = vpack.c.b16 %v1625, %v1621
  %v1742 = vpack.c.b16 %v1626, %v1622
  %v1743 = vpack.c.b16 %v1631, %v1627
  %v1744 = vpack.c.b16 %v1632, %v1628
  %v1745 = vpack.c.b16 %v1633, %v1629
  %v1746 = vpack.c.b16 %v1634, %v1630
  %v1747 = vpack.c.b16 %v1639, %v1635
  %v1748 = vpack.c.b16 %v1640, %v1636
  %v1749 = vpack.c.b16 %v1641, %v1637
  %v1750 = vpack.c.b16 %v1642, %v1638
  %v1751 = vpack.c.b16 %v1647, %v1643
  %v1752 = vpack.c.b16 %v1648, %v1644
  %v1753 = vpack.c.b16 %v1649, %v1645
  %v1754 = vpack.c.b16 %v1650, %v1646
  %v1755 = vpack.c.b16 %v1655, %v1651
  %v1756 = vpack.c.b16 %v1656, %v1652
  %v1757 = vpack.c.b16 %v1657, %v1653
  %v1758 = vpack.c.b16 %v1658, %v1654
  %v1759 = vpack.c.b16 %v1663, %v1659
  %v1760 = vpack.c.b16 %v1664, %v1660
  %v1761 = vpack.c.b16 %v1665, %v1661
  %v1762 = vpack.c.b16 %v1666, %v1662
  %v1763 = vpack.c.b16 %v1671, %v1667
  %v1764 = vpack.c.b16 %v1672, %v1668
  %v1765 = vpack.c.b16 %v1673, %v1669
  %v1766 = vpack.c.b16 %v1674, %v1670
  %v1767 = vpack.c.b16 %v1679, %v1675
  %v1768 = vpack.c.b16 %v1680, %v1676
  %v1769 = vpack.c.b16 %v1681, %v1677
  %v1770 = vpack.c.b16 %v1682, %v1678
  %v1771 = vpack.c.b16 %v1687, %v1683
  %v1772 = vpack.c.b16 %v1688, %v1684
  %v1773 = vpack.c.b16 %v1689, %v1685
  %v1774 = vpack.c.b16 %v1690, %v1686
  %v1775 = vpack.c.b16 %v1695, %v1691
  %v1776 = vpack.c.b16 %v1696, %v1692
  %v1777 = vpack.c.b16 %v1697, %v1693
  %v1778 = vpack.c.b16 %v1698, %v1694
  %v1779 = vpack.c.b16 %v1703, %v1699
  %v1780 = vpack.c.b16 %v1704, %v1700
  %v1781 = vpack.c.b16 %v1705, %v1701
  %v1782 = vpack.c.b16 %v1706, %v1702
  %v1783 = vpack.c.b16 %v1711, %v1707
  %v1784 = vpack.c.b16 %v1712, %v1708
  %v1785 = vpack.c.b16 %v1713, %v1709
  %v1786 = vpack.c.b16 %v1714, %v1710
  %v1787 = vpack.c.b16 %v1719, %v1715
  %v1788 = vpack.c.b16 %v1720, %v1716
  %v1789 = vpack.c.b16 %v1721, %v1717
  %v1790 = vpack.c.b16 %v1722, %v1718
  %v1791 = vpack.c.b16 %v1727, %v1723
  %v1792 = vpack.c.b16 %v1728, %v1724
  %v1793 = vpack.c.b16 %v1729, %v1725
  %v1794 = vpack.c.b16 %v1730, %v1726
  %1859 = vmatprep.subr.bf16.mxu0 %v1760
  %1860 = vmatpush1.bf16.msra.mxu0 %v1759
  %1861 = vmatprep.subr.bf16.mxu0 %v1756
  %1862 = vmatpush1.bf16.msra.mxu0 %v1755
  %1863 = vmatprep.subr.bf16.mxu0 %v1752
  %1864 = vmatpush1.bf16.msra.mxu0 %v1751
  %1865 = vmatprep.subr.bf16.mxu0 %v1748
  %1866 = vmatpush1.bf16.msra.mxu0 %v1747
  %1867 = vmatprep.subr.bf16.mxu0 %v1744
  %1868 = vmatpush1.bf16.msra.mxu0 %v1743
  %1869 = vmatprep.subr.bf16.mxu0 %v1740
  %1870 = vmatpush1.bf16.msra.mxu0 %v1739
  %1871 = vmatprep.subr.bf16.mxu0 %v1736
  %1872 = vmatpush1.bf16.msra.mxu0 %v1735
  %1873 = vmatprep.subr.bf16.mxu0 %v1732
  %1874 = vmatpush1.bf16.msra.mxu0 %v1731
  %1875 = vmatprep.subr.bf16.mxu0 %v1792
  %1876 = vmatpush2.bf16.msra.mxu0 %v1791
  %1877 = vmatprep.subr.bf16.mxu0 %v1788
  %1878 = vmatpush2.bf16.msra.mxu0 %v1787
  %1879 = vmatprep.subr.bf16.mxu0 %v1784
  %1880 = vmatpush2.bf16.msra.mxu0 %v1783
  %1881 = vmatprep.subr.bf16.mxu0 %v1780
  %1882 = vmatpush2.bf16.msra.mxu0 %v1779
  %1883 = vmatprep.subr.bf16.mxu0 %v1776
  %1884 = vmatpush2.bf16.msra.mxu0 %v1775
  %1885 = vmatprep.subr.bf16.mxu0 %v1772
  %1886 = vmatpush2.bf16.msra.mxu0 %v1771
  %1887 = vmatprep.subr.bf16.mxu0 %v1768
  %1888 = vmatpush2.bf16.msra.mxu0 %v1767
  %1889 = vmatprep.subr.bf16.mxu0 %v1764
  %1890 = vmatpush2.bf16.msra.mxu0 %v1763
  %1891 = vmatprep.mubr.bf16.mxu0 %v1444
  %1892 = vmatmul.mubr.bf16.gmra.mxu0 %v1443
  %v1893 = vpop.f32.mrf.mxu0
  %v1894 = vadd.f32 0.0, %v1893
  %v1895 = vpop.f32.mrf.mxu0
  %v1896 = vadd.f32 0.0, %v1895
  %v1897 = vpop.f32.mrf.mxu0
  %v1898 = vadd.f32 0.0, %v1897
  %v1899 = vpop.f32.mrf.mxu0
  %v1900 = vadd.f32 0.0, %v1899
  %1901 = vmatprep.mubr.bf16.mxu0 %v1446
  %1902 = vmatmul.mubr.bf16.gmra.mxu0 %v1445
  %v1903 = vpop.f32.mrf.mxu0
  %v1904 = vadd.f32 0.0, %v1903
  %v1905 = vpop.f32.mrf.mxu0
  %v1906 = vadd.f32 0.0, %v1905
  %v1907 = vpop.f32.mrf.mxu0
  %v1908 = vadd.f32 0.0, %v1907
  %v1909 = vpop.f32.mrf.mxu0
  %v1910 = vadd.f32 0.0, %v1909
  %1911 = vmatprep.mubr.bf16.mxu0 %v1448
  %1912 = vmatmul.mubr.bf16.gmra.mxu0 %v1447
  %v1913 = vpop.f32.mrf.mxu0
  %v1914 = vadd.f32 0.0, %v1913
  %v1915 = vpop.f32.mrf.mxu0
  %v1916 = vadd.f32 0.0, %v1915
  %v1917 = vpop.f32.mrf.mxu0
  %v1918 = vadd.f32 0.0, %v1917
  %v1919 = vpop.f32.mrf.mxu0
  %v1920 = vadd.f32 0.0, %v1919
  %1921 = vmatprep.mubr.bf16.mxu0 %v1450
  %1922 = vmatmul.mubr.bf16.gmra.mxu0 %v1449
  %v1923 = vpop.f32.mrf.mxu0
  %v1924 = vadd.f32 0.0, %v1923
  %v1925 = vpop.f32.mrf.mxu0
  %v1926 = vadd.f32 0.0, %v1925
  %v1927 = vpop.f32.mrf.mxu0
  %v1928 = vadd.f32 0.0, %v1927
  %v1929 = vpop.f32.mrf.mxu0
  %v1930 = vadd.f32 0.0, %v1929
  %1931 = vmatprep.mubr.bf16.mxu0 %v1452
  %1932 = vmatmul.mubr.bf16.gmra.mxu0 %v1451
  %v1933 = vpop.f32.mrf.mxu0
  %v1934 = vadd.f32 0.0, %v1933
  %v1935 = vpop.f32.mrf.mxu0
  %v1936 = vadd.f32 0.0, %v1935
  %v1937 = vpop.f32.mrf.mxu0
  %v1938 = vadd.f32 0.0, %v1937
  %v1939 = vpop.f32.mrf.mxu0
  %v1940 = vadd.f32 0.0, %v1939
  %1941 = vmatprep.mubr.bf16.mxu0 %v1454
  %1942 = vmatmul.mubr.bf16.gmra.mxu0 %v1453
  %v1943 = vpop.f32.mrf.mxu0
  %v1944 = vadd.f32 0.0, %v1943
  %v1945 = vpop.f32.mrf.mxu0
  %v1946 = vadd.f32 0.0, %v1945
  %v1947 = vpop.f32.mrf.mxu0
  %v1948 = vadd.f32 0.0, %v1947
  %v1949 = vpop.f32.mrf.mxu0
  %v1950 = vadd.f32 0.0, %v1949
  %1951 = vmatprep.mubr.bf16.mxu0 %v1456
  %1952 = vmatmul.mubr.bf16.gmra.mxu0 %v1455
  %v1953 = vpop.f32.mrf.mxu0
  %v1954 = vadd.f32 0.0, %v1953
  %v1955 = vpop.f32.mrf.mxu0
  %v1956 = vadd.f32 0.0, %v1955
  %v1957 = vpop.f32.mrf.mxu0
  %v1958 = vadd.f32 0.0, %v1957
  %v1959 = vpop.f32.mrf.mxu0
  %v1960 = vadd.f32 0.0, %v1959
  %1961 = vmatprep.mubr.bf16.mxu0 %v1458
  %1962 = vmatmul.mubr.bf16.gmra.mxu0 %v1457
  %v1963 = vpop.f32.mrf.mxu0
  %v1964 = vadd.f32 0.0, %v1963
  %v1965 = vpop.f32.mrf.mxu0
  %v1966 = vadd.f32 0.0, %v1965
  %v1967 = vpop.f32.mrf.mxu0
  %v1968 = vadd.f32 0.0, %v1967
  %v1969 = vpop.f32.mrf.mxu0
  %v1970 = vadd.f32 0.0, %v1969
  %1971 = vmatprep.mubr.bf16.mxu0 %v1460
  %1972 = vmatmul.mubr.bf16.gmra.mxu0 %v1459
  %v1973 = vpop.f32.mrf.mxu0
  %v1974 = vadd.f32 0.0, %v1973
  %v1975 = vpop.f32.mrf.mxu0
  %v1976 = vadd.f32 0.0, %v1975
  %v1977 = vpop.f32.mrf.mxu0
  %v1978 = vadd.f32 0.0, %v1977
  %v1979 = vpop.f32.mrf.mxu0
  %v1980 = vadd.f32 0.0, %v1979
  %1981 = vmatprep.mubr.bf16.mxu0 %v1462
  %1982 = vmatmul.mubr.bf16.gmra.mxu0 %v1461
  %v1983 = vpop.f32.mrf.mxu0
  %v1984 = vadd.f32 0.0, %v1983
  %v1985 = vpop.f32.mrf.mxu0
  %v1986 = vadd.f32 0.0, %v1985
  %v1987 = vpop.f32.mrf.mxu0
  %v1988 = vadd.f32 0.0, %v1987
  %v1989 = vpop.f32.mrf.mxu0
  %v1990 = vadd.f32 0.0, %v1989
  %1991 = vmatprep.mubr.bf16.mxu0 %v1464
  %1992 = vmatmul.mubr.bf16.gmra.mxu0 %v1463
  %v1993 = vpop.f32.mrf.mxu0
  %v1994 = vadd.f32 0.0, %v1993
  %v1995 = vpop.f32.mrf.mxu0
  %v1996 = vadd.f32 0.0, %v1995
  %v1997 = vpop.f32.mrf.mxu0
  %v1998 = vadd.f32 0.0, %v1997
  %v1999 = vpop.f32.mrf.mxu0
  %v2000 = vadd.f32 0.0, %v1999
  %2001 = vmatprep.mubr.bf16.mxu0 %v1466
  %2002 = vmatmul.mubr.bf16.gmra.mxu0 %v1465
  %v2003 = vpop.f32.mrf.mxu0
  %v2004 = vadd.f32 0.0, %v2003
  %v2005 = vpop.f32.mrf.mxu0
  %v2006 = vadd.f32 0.0, %v2005
  %v2007 = vpop.f32.mrf.mxu0
  %v2008 = vadd.f32 0.0, %v2007
  %v2009 = vpop.f32.mrf.mxu0
  %v2010 = vadd.f32 0.0, %v2009
  %2011 = vmatprep.mubr.bf16.mxu0 %v1468
  %2012 = vmatmul.mubr.bf16.gmra.mxu0 %v1467
  %v2013 = vpop.f32.mrf.mxu0
  %v2014 = vadd.f32 0.0, %v2013
  %v2015 = vpop.f32.mrf.mxu0
  %v2016 = vadd.f32 0.0, %v2015
  %v2017 = vpop.f32.mrf.mxu0
  %v2018 = vadd.f32 0.0, %v2017
  %v2019 = vpop.f32.mrf.mxu0
  %v2020 = vadd.f32 0.0, %v2019
  %2021 = vmatprep.mubr.bf16.mxu0 %v1470
  %2022 = vmatmul.mubr.bf16.gmra.mxu0 %v1469
  %v2023 = vpop.f32.mrf.mxu0
  %v2024 = vadd.f32 0.0, %v2023
  %v2025 = vpop.f32.mrf.mxu0
  %v2026 = vadd.f32 0.0, %v2025
  %v2027 = vpop.f32.mrf.mxu0
  %v2028 = vadd.f32 0.0, %v2027
  %v2029 = vpop.f32.mrf.mxu0
  %v2030 = vadd.f32 0.0, %v2029
  %2031 = vmatprep.mubr.bf16.mxu0 %v1472
  %2032 = vmatmul.mubr.bf16.gmra.mxu0 %v1471
  %v2033 = vpop.f32.mrf.mxu0
  %v2034 = vadd.f32 0.0, %v2033
  %v2035 = vpop.f32.mrf.mxu0
  %v2036 = vadd.f32 0.0, %v2035
  %v2037 = vpop.f32.mrf.mxu0
  %v2038 = vadd.f32 0.0, %v2037
  %v2039 = vpop.f32.mrf.mxu0
  %v2040 = vadd.f32 0.0, %v2039
  %2041 = vmatprep.mubr.bf16.mxu0 %v1474
  %2042 = vmatmul.mubr.bf16.gmra.mxu0 %v1473
  %v2043 = vpop.f32.mrf.mxu0
  %v2044 = vadd.f32 0.0, %v2043
  %v2045 = vpop.f32.mrf.mxu0
  %v2046 = vadd.f32 0.0, %v2045
  %v2047 = vpop.f32.mrf.mxu0
  %v2048 = vadd.f32 0.0, %v2047
  %v2049 = vpop.f32.mrf.mxu0
  %v2050 = vadd.f32 0.0, %v2049
  %2051 = vdwg.mxu0
  %2052 = vmatprep.subr.bf16.mxu0 %v1762
  %2053 = vmatpush1.bf16.msra.mxu0 %v1761
  %2054 = vmatprep.subr.bf16.mxu0 %v1758
  %2055 = vmatpush1.bf16.msra.mxu0 %v1757
  %2056 = vmatprep.subr.bf16.mxu0 %v1754
  %2057 = vmatpush1.bf16.msra.mxu0 %v1753
  %2058 = vmatprep.subr.bf16.mxu0 %v1750
  %2059 = vmatpush1.bf16.msra.mxu0 %v1749
  %2060 = vmatprep.subr.bf16.mxu0 %v1746
  %2061 = vmatpush1.bf16.msra.mxu0 %v1745
  %2062 = vmatprep.subr.bf16.mxu0 %v1742
  %2063 = vmatpush1.bf16.msra.mxu0 %v1741
  %2064 = vmatprep.subr.bf16.mxu0 %v1738
  %2065 = vmatpush1.bf16.msra.mxu0 %v1737
  %2066 = vmatprep.subr.bf16.mxu0 %v1734
  %2067 = vmatpush1.bf16.msra.mxu0 %v1733
  %2068 = vmatprep.subr.bf16.mxu0 %v1794
  %2069 = vmatpush2.bf16.msra.mxu0 %v1793
  %2070 = vmatprep.subr.bf16.mxu0 %v1790
  %2071 = vmatpush2.bf16.msra.mxu0 %v1789
  %2072 = vmatprep.subr.bf16.mxu0 %v1786
  %2073 = vmatpush2.bf16.msra.mxu0 %v1785
  %2074 = vmatprep.subr.bf16.mxu0 %v1782
  %2075 = vmatpush2.bf16.msra.mxu0 %v1781
  %2076 = vmatprep.subr.bf16.mxu0 %v1778
  %2077 = vmatpush2.bf16.msra.mxu0 %v1777
  %2078 = vmatprep.subr.bf16.mxu0 %v1774
  %2079 = vmatpush2.bf16.msra.mxu0 %v1773
  %2080 = vmatprep.subr.bf16.mxu0 %v1770
  %2081 = vmatpush2.bf16.msra.mxu0 %v1769
  %2082 = vmatprep.subr.bf16.mxu0 %v1766
  %2083 = vmatpush2.bf16.msra.mxu0 %v1765
  %2084 = vmatprep.mubr.bf16.mxu0 %v1444
  %2085 = vmatmul.mubr.bf16.gmra.mxu0 %v1443
  %v2086 = vpop.f32.mrf.mxu0
  %v2087 = vadd.f32 0.0, %v2086
  %v2088 = vpop.f32.mrf.mxu0
  %v2089 = vadd.f32 0.0, %v2088
  %v2090 = vpop.f32.mrf.mxu0
  %v2091 = vadd.f32 0.0, %v2090
  %v2092 = vpop.f32.mrf.mxu0
  %v2093 = vadd.f32 0.0, %v2092
  %2094 = vmatprep.mubr.bf16.mxu0 %v1446
  %2095 = vmatmul.mubr.bf16.gmra.mxu0 %v1445
  %v2096 = vpop.f32.mrf.mxu0
  %v2097 = vadd.f32 0.0, %v2096
  %v2098 = vpop.f32.mrf.mxu0
  %v2099 = vadd.f32 0.0, %v2098
  %v2100 = vpop.f32.mrf.mxu0
  %v2101 = vadd.f32 0.0, %v2100
  %v2102 = vpop.f32.mrf.mxu0
  %v2103 = vadd.f32 0.0, %v2102
  %2104 = vmatprep.mubr.bf16.mxu0 %v1448
  %2105 = vmatmul.mubr.bf16.gmra.mxu0 %v1447
  %v2106 = vpop.f32.mrf.mxu0
  %v2107 = vadd.f32 0.0, %v2106
  %v2108 = vpop.f32.mrf.mxu0
  %v2109 = vadd.f32 0.0, %v2108
  %v2110 = vpop.f32.mrf.mxu0
  %v2111 = vadd.f32 0.0, %v2110
  %v2112 = vpop.f32.mrf.mxu0
  %v2113 = vadd.f32 0.0, %v2112
  %2114 = vmatprep.mubr.bf16.mxu0 %v1450
  %2115 = vmatmul.mubr.bf16.gmra.mxu0 %v1449
  %v2116 = vpop.f32.mrf.mxu0
  %v2117 = vadd.f32 0.0, %v2116
  %v2118 = vpop.f32.mrf.mxu0
  %v2119 = vadd.f32 0.0, %v2118
  %v2120 = vpop.f32.mrf.mxu0
  %v2121 = vadd.f32 0.0, %v2120
  %v2122 = vpop.f32.mrf.mxu0
  %v2123 = vadd.f32 0.0, %v2122
  %2124 = vmatprep.mubr.bf16.mxu0 %v1452
  %2125 = vmatmul.mubr.bf16.gmra.mxu0 %v1451
  %v2126 = vpop.f32.mrf.mxu0
  %v2127 = vadd.f32 0.0, %v2126
  %v2128 = vpop.f32.mrf.mxu0
  %v2129 = vadd.f32 0.0, %v2128
  %v2130 = vpop.f32.mrf.mxu0
  %v2131 = vadd.f32 0.0, %v2130
  %v2132 = vpop.f32.mrf.mxu0
  %v2133 = vadd.f32 0.0, %v2132
  %2134 = vmatprep.mubr.bf16.mxu0 %v1454
  %2135 = vmatmul.mubr.bf16.gmra.mxu0 %v1453
  %v2136 = vpop.f32.mrf.mxu0
  %v2137 = vadd.f32 0.0, %v2136
  %v2138 = vpop.f32.mrf.mxu0
  %v2139 = vadd.f32 0.0, %v2138
  %v2140 = vpop.f32.mrf.mxu0
  %v2141 = vadd.f32 0.0, %v2140
  %v2142 = vpop.f32.mrf.mxu0
  %v2143 = vadd.f32 0.0, %v2142
  %2144 = vmatprep.mubr.bf16.mxu0 %v1456
  %2145 = vmatmul.mubr.bf16.gmra.mxu0 %v1455
  %v2146 = vpop.f32.mrf.mxu0
  %v2147 = vadd.f32 0.0, %v2146
  %v2148 = vpop.f32.mrf.mxu0
  %v2149 = vadd.f32 0.0, %v2148
  %v2150 = vpop.f32.mrf.mxu0
  %v2151 = vadd.f32 0.0, %v2150
  %v2152 = vpop.f32.mrf.mxu0
  %v2153 = vadd.f32 0.0, %v2152
  %2154 = vmatprep.mubr.bf16.mxu0 %v1458
  %2155 = vmatmul.mubr.bf16.gmra.mxu0 %v1457
  %v2156 = vpop.f32.mrf.mxu0
  %v2157 = vadd.f32 0.0, %v2156
  %v2158 = vpop.f32.mrf.mxu0
  %v2159 = vadd.f32 0.0, %v2158
  %v2160 = vpop.f32.mrf.mxu0
  %v2161 = vadd.f32 0.0, %v2160
  %v2162 = vpop.f32.mrf.mxu0
  %v2163 = vadd.f32 0.0, %v2162
  %2164 = vmatprep.mubr.bf16.mxu0 %v1460
  %2165 = vmatmul.mubr.bf16.gmra.mxu0 %v1459
  %v2166 = vpop.f32.mrf.mxu0
  %v2167 = vadd.f32 0.0, %v2166
  %v2168 = vpop.f32.mrf.mxu0
  %v2169 = vadd.f32 0.0, %v2168
  %v2170 = vpop.f32.mrf.mxu0
  %v2171 = vadd.f32 0.0, %v2170
  %v2172 = vpop.f32.mrf.mxu0
  %v2173 = vadd.f32 0.0, %v2172
  %2174 = vmatprep.mubr.bf16.mxu0 %v1462
  %2175 = vmatmul.mubr.bf16.gmra.mxu0 %v1461
  %v2176 = vpop.f32.mrf.mxu0
  %v2177 = vadd.f32 0.0, %v2176
  %v2178 = vpop.f32.mrf.mxu0
  %v2179 = vadd.f32 0.0, %v2178
  %v2180 = vpop.f32.mrf.mxu0
  %v2181 = vadd.f32 0.0, %v2180
  %v2182 = vpop.f32.mrf.mxu0
  %v2183 = vadd.f32 0.0, %v2182
  %2184 = vmatprep.mubr.bf16.mxu0 %v1464
  %2185 = vmatmul.mubr.bf16.gmra.mxu0 %v1463
  %v2186 = vpop.f32.mrf.mxu0
  %v2187 = vadd.f32 0.0, %v2186
  %v2188 = vpop.f32.mrf.mxu0
  %v2189 = vadd.f32 0.0, %v2188
  %v2190 = vpop.f32.mrf.mxu0
  %v2191 = vadd.f32 0.0, %v2190
  %v2192 = vpop.f32.mrf.mxu0
  %v2193 = vadd.f32 0.0, %v2192
  %2194 = vmatprep.mubr.bf16.mxu0 %v1466
  %2195 = vmatmul.mubr.bf16.gmra.mxu0 %v1465
  %v2196 = vpop.f32.mrf.mxu0
  %v2197 = vadd.f32 0.0, %v2196
  %v2198 = vpop.f32.mrf.mxu0
  %v2199 = vadd.f32 0.0, %v2198
  %v2200 = vpop.f32.mrf.mxu0
  %v2201 = vadd.f32 0.0, %v2200
  %v2202 = vpop.f32.mrf.mxu0
  %v2203 = vadd.f32 0.0, %v2202
  %2204 = vmatprep.mubr.bf16.mxu0 %v1468
  %2205 = vmatmul.mubr.bf16.gmra.mxu0 %v1467
  %v2206 = vpop.f32.mrf.mxu0
  %v2207 = vadd.f32 0.0, %v2206
  %v2208 = vpop.f32.mrf.mxu0
  %v2209 = vadd.f32 0.0, %v2208
  %v2210 = vpop.f32.mrf.mxu0
  %v2211 = vadd.f32 0.0, %v2210
  %v2212 = vpop.f32.mrf.mxu0
  %v2213 = vadd.f32 0.0, %v2212
  %2214 = vmatprep.mubr.bf16.mxu0 %v1470
  %2215 = vmatmul.mubr.bf16.gmra.mxu0 %v1469
  %v2216 = vpop.f32.mrf.mxu0
  %v2217 = vadd.f32 0.0, %v2216
  %v2218 = vpop.f32.mrf.mxu0
  %v2219 = vadd.f32 0.0, %v2218
  %v2220 = vpop.f32.mrf.mxu0
  %v2221 = vadd.f32 0.0, %v2220
  %v2222 = vpop.f32.mrf.mxu0
  %v2223 = vadd.f32 0.0, %v2222
  %2224 = vmatprep.mubr.bf16.mxu0 %v1472
  %2225 = vmatmul.mubr.bf16.gmra.mxu0 %v1471
  %v2226 = vpop.f32.mrf.mxu0
  %v2227 = vadd.f32 0.0, %v2226
  %v2228 = vpop.f32.mrf.mxu0
  %v2229 = vadd.f32 0.0, %v2228
  %v2230 = vpop.f32.mrf.mxu0
  %v2231 = vadd.f32 0.0, %v2230
  %v2232 = vpop.f32.mrf.mxu0
  %v2233 = vadd.f32 0.0, %v2232
  %2234 = vmatprep.mubr.bf16.mxu0 %v1474
  %2235 = vmatmul.mubr.bf16.gmra.mxu0 %v1473
  %v2236 = vpop.f32.mrf.mxu0
  %v2237 = vadd.f32 0.0, %v2236
  %v2238 = vpop.f32.mrf.mxu0
  %v2239 = vadd.f32 0.0, %v2238
  %v2240 = vpop.f32.mrf.mxu0
  %v2241 = vadd.f32 0.0, %v2240
  %v2242 = vpop.f32.mrf.mxu0
  %v2243 = vadd.f32 0.0, %v2242
  %2244 = vdwg.mxu0
  %v2245 = vld [vmem:[%s7] sm:$0xf]
  %v2246 = vld [vmem:[%s8] sm:$0xf]
  %v2247 = vadd.f32 %v1894, %v1898
  %v2248 = vadd.f32 %v2247, %v1904
  %v2249 = vadd.f32 %v2248, %v1908
  %v2250 = vadd.f32 %v2249, %v1914
  %v2251 = vadd.f32 %v2250, %v1918
  %v2252 = vadd.f32 %v2251, %v1924
  %v2253 = vadd.f32 %v2252, %v1928
  %v2254 = vadd.f32 %v2253, %v1934
  %v2255 = vadd.f32 %v2254, %v1938
  %v2256 = vadd.f32 %v2255, %v1944
  %v2257 = vadd.f32 %v2256, %v1948
  %v2258 = vadd.f32 %v2257, %v1954
  %v2259 = vadd.f32 %v2258, %v1958
  %v2260 = vadd.f32 %v2259, %v1964
  %v2261 = vadd.f32 %v2260, %v1968
  %v2262 = vadd.f32 %v2261, %v1974
  %v2263 = vadd.f32 %v2262, %v1978
  %v2264 = vadd.f32 %v2263, %v1984
  %v2265 = vadd.f32 %v2264, %v1988
  %v2266 = vadd.f32 %v2265, %v1994
  %v2267 = vadd.f32 %v2266, %v1998
  %v2268 = vadd.f32 %v2267, %v2004
  %v2269 = vadd.f32 %v2268, %v2008
  %v2270 = vadd.f32 %v2269, %v2014
  %v2271 = vadd.f32 %v2270, %v2018
  %v2272 = vadd.f32 %v2271, %v2024
  %v2273 = vadd.f32 %v2272, %v2028
  %v2274 = vadd.f32 %v2273, %v2034
  %v2275 = vadd.f32 %v2274, %v2038
  %v2276 = vadd.f32 %v2275, %v2044
  %v2277 = vadd.f32 %v2276, %v2048
  %v2278 = vrot.slane %v2277, 4
  %v2279 = vadd.f32 %v2277, %v2278
  %v2280 = vrot.slane %v2279, 2
  %v2281 = vadd.f32 %v2279, %v2280
  %v2282 = vrot.slane %v2281, 1
  %v2283 = vadd.f32 %v2281, %v2282
  %v2284 = vadd.f32 %v1896, %v1900
  %v2285 = vadd.f32 %v2284, %v1906
  %v2286 = vadd.f32 %v2285, %v1910
  %v2287 = vadd.f32 %v2286, %v1916
  %v2288 = vadd.f32 %v2287, %v1920
  %v2289 = vadd.f32 %v2288, %v1926
  %v2290 = vadd.f32 %v2289, %v1930
  %v2291 = vadd.f32 %v2290, %v1936
  %v2292 = vadd.f32 %v2291, %v1940
  %v2293 = vadd.f32 %v2292, %v1946
  %v2294 = vadd.f32 %v2293, %v1950
  %v2295 = vadd.f32 %v2294, %v1956
  %v2296 = vadd.f32 %v2295, %v1960
  %v2297 = vadd.f32 %v2296, %v1966
  %v2298 = vadd.f32 %v2297, %v1970
  %v2299 = vadd.f32 %v2298, %v1976
  %v2300 = vadd.f32 %v2299, %v1980
  %v2301 = vadd.f32 %v2300, %v1986
  %v2302 = vadd.f32 %v2301, %v1990
  %v2303 = vadd.f32 %v2302, %v1996
  %v2304 = vadd.f32 %v2303, %v2000
  %v2305 = vadd.f32 %v2304, %v2006
  %v2306 = vadd.f32 %v2305, %v2010
  %v2307 = vadd.f32 %v2306, %v2016
  %v2308 = vadd.f32 %v2307, %v2020
  %v2309 = vadd.f32 %v2308, %v2026
  %v2310 = vadd.f32 %v2309, %v2030
  %v2311 = vadd.f32 %v2310, %v2036
  %v2312 = vadd.f32 %v2311, %v2040
  %v2313 = vadd.f32 %v2312, %v2046
  %v2314 = vadd.f32 %v2313, %v2050
  %v2315 = vrot.slane %v2314, 4
  %v2316 = vadd.f32 %v2314, %v2315
  %v2317 = vrot.slane %v2316, 2
  %v2318 = vadd.f32 %v2316, %v2317
  %v2319 = vrot.slane %v2318, 1
  %v2320 = vadd.f32 %v2318, %v2319
  %v2321 = vadd.f32 %v2087, %v2091
  %v2322 = vadd.f32 %v2321, %v2097
  %v2323 = vadd.f32 %v2322, %v2101
  %v2324 = vadd.f32 %v2323, %v2107
  %v2325 = vadd.f32 %v2324, %v2111
  %v2326 = vadd.f32 %v2325, %v2117
  %v2327 = vadd.f32 %v2326, %v2121
  %v2328 = vadd.f32 %v2327, %v2127
  %v2329 = vadd.f32 %v2328, %v2131
  %v2330 = vadd.f32 %v2329, %v2137
  %v2331 = vadd.f32 %v2330, %v2141
  %v2332 = vadd.f32 %v2331, %v2147
  %v2333 = vadd.f32 %v2332, %v2151
  %v2334 = vadd.f32 %v2333, %v2157
  %v2335 = vadd.f32 %v2334, %v2161
  %v2336 = vadd.f32 %v2335, %v2167
  %v2337 = vadd.f32 %v2336, %v2171
  %v2338 = vadd.f32 %v2337, %v2177
  %v2339 = vadd.f32 %v2338, %v2181
  %v2340 = vadd.f32 %v2339, %v2187
  %v2341 = vadd.f32 %v2340, %v2191
  %v2342 = vadd.f32 %v2341, %v2197
  %v2343 = vadd.f32 %v2342, %v2201
  %v2344 = vadd.f32 %v2343, %v2207
  %v2345 = vadd.f32 %v2344, %v2211
  %v2346 = vadd.f32 %v2345, %v2217
  %v2347 = vadd.f32 %v2346, %v2221
  %v2348 = vadd.f32 %v2347, %v2227
  %v2349 = vadd.f32 %v2348, %v2231
  %v2350 = vadd.f32 %v2349, %v2237
  %v2351 = vadd.f32 %v2350, %v2241
  %v2352 = vrot.slane %v2351, 4
  %v2353 = vadd.f32 %v2351, %v2352
  %v2354 = vrot.slane %v2353, 2
  %v2355 = vadd.f32 %v2353, %v2354
  %v2356 = vrot.slane %v2355, 1
  %v2357 = vadd.f32 %v2355, %v2356
  %v2358 = vadd.f32 %v2089, %v2093
  %v2359 = vadd.f32 %v2358, %v2099
  %v2360 = vadd.f32 %v2359, %v2103
  %v2361 = vadd.f32 %v2360, %v2109
  %v2362 = vadd.f32 %v2361, %v2113
  %v2363 = vadd.f32 %v2362, %v2119
  %v2364 = vadd.f32 %v2363, %v2123
  %v2365 = vadd.f32 %v2364, %v2129
  %v2366 = vadd.f32 %v2365, %v2133
  %v2367 = vadd.f32 %v2366, %v2139
  %v2368 = vadd.f32 %v2367, %v2143
  %v2369 = vadd.f32 %v2368, %v2149
  %v2370 = vadd.f32 %v2369, %v2153
  %v2371 = vadd.f32 %v2370, %v2159
  %v2372 = vadd.f32 %v2371, %v2163
  %v2373 = vadd.f32 %v2372, %v2169
  %v2374 = vadd.f32 %v2373, %v2173
  %v2375 = vadd.f32 %v2374, %v2179
  %v2376 = vadd.f32 %v2375, %v2183
  %v2377 = vadd.f32 %v2376, %v2189
  %v2378 = vadd.f32 %v2377, %v2193
  %v2379 = vadd.f32 %v2378, %v2199
  %v2380 = vadd.f32 %v2379, %v2203
  %v2381 = vadd.f32 %v2380, %v2209
  %v2382 = vadd.f32 %v2381, %v2213
  %v2383 = vadd.f32 %v2382, %v2219
  %v2384 = vadd.f32 %v2383, %v2223
  %v2385 = vadd.f32 %v2384, %v2229
  %v2386 = vadd.f32 %v2385, %v2233
  %v2387 = vadd.f32 %v2386, %v2239
  %v2388 = vadd.f32 %v2387, %v2243
  %v2389 = vrot.slane %v2388, 4
  %v2390 = vadd.f32 %v2388, %v2389
  %v2391 = vrot.slane %v2390, 2
  %v2392 = vadd.f32 %v2390, %v2391
  %v2393 = vrot.slane %v2392, 1
  %v2394 = vadd.f32 %v2392, %v2393
  %v2395 = vmul.f32 %v2283, %v908
  %v2396 = vmul.f32 %v2320, %v908
  %v2397 = vmul.f32 %v2357, %v908
  %v2398 = vmul.f32 %v2394, %v908
  %v2399 = vmul.f32 %v1894, %v1894
  %v2400 = vmul.f32 %v1896, %v1896
  %v2401 = vmul.f32 %v2087, %v2087
  %v2402 = vmul.f32 %v2089, %v2089
  %v2403 = vmul.f32 %v1898, %v1898
  %v2404 = vmul.f32 %v1900, %v1900
  %v2405 = vmul.f32 %v2091, %v2091
  %v2406 = vmul.f32 %v2093, %v2093
  %v2407 = vmul.f32 %v1904, %v1904
  %v2408 = vmul.f32 %v1906, %v1906
  %v2409 = vmul.f32 %v2097, %v2097
  %v2410 = vmul.f32 %v2099, %v2099
  %v2411 = vmul.f32 %v1908, %v1908
  %v2412 = vmul.f32 %v1910, %v1910
  %v2413 = vmul.f32 %v2101, %v2101
  %v2414 = vmul.f32 %v2103, %v2103
  %v2415 = vmul.f32 %v1914, %v1914
  %v2416 = vmul.f32 %v1916, %v1916
  %v2417 = vmul.f32 %v2107, %v2107
  %v2418 = vmul.f32 %v2109, %v2109
  %v2419 = vmul.f32 %v1918, %v1918
  %v2420 = vmul.f32 %v1920, %v1920
  %v2421 = vmul.f32 %v2111, %v2111
  %v2422 = vmul.f32 %v2113, %v2113
  %v2423 = vmul.f32 %v1924, %v1924
  %v2424 = vmul.f32 %v1926, %v1926
  %v2425 = vmul.f32 %v2117, %v2117
  %v2426 = vmul.f32 %v2119, %v2119
  %v2427 = vmul.f32 %v1928, %v1928
  %v2428 = vmul.f32 %v1930, %v1930
  %v2429 = vmul.f32 %v2121, %v2121
  %v2430 = vmul.f32 %v2123, %v2123
  %v2431 = vmul.f32 %v1934, %v1934
  %v2432 = vmul.f32 %v1936, %v1936
  %v2433 = vmul.f32 %v2127, %v2127
  %v2434 = vmul.f32 %v2129, %v2129
  %v2435 = vmul.f32 %v1938, %v1938
  %v2436 = vmul.f32 %v1940, %v1940
  %v2437 = vmul.f32 %v2131, %v2131
  %v2438 = vmul.f32 %v2133, %v2133
  %v2439 = vmul.f32 %v1944, %v1944
  %v2440 = vmul.f32 %v1946, %v1946
  %v2441 = vmul.f32 %v2137, %v2137
  %v2442 = vmul.f32 %v2139, %v2139
  %v2443 = vmul.f32 %v1948, %v1948
  %v2444 = vmul.f32 %v1950, %v1950
  %v2445 = vmul.f32 %v2141, %v2141
  %v2446 = vmul.f32 %v2143, %v2143
  %v2447 = vmul.f32 %v1954, %v1954
  %v2448 = vmul.f32 %v1956, %v1956
  %v2449 = vmul.f32 %v2147, %v2147
  %v2450 = vmul.f32 %v2149, %v2149
  %v2451 = vmul.f32 %v1958, %v1958
  %v2452 = vmul.f32 %v1960, %v1960
  %v2453 = vmul.f32 %v2151, %v2151
  %v2454 = vmul.f32 %v2153, %v2153
  %v2455 = vmul.f32 %v1964, %v1964
  %v2456 = vmul.f32 %v1966, %v1966
  %v2457 = vmul.f32 %v2157, %v2157
  %v2458 = vmul.f32 %v2159, %v2159
  %v2459 = vmul.f32 %v1968, %v1968
  %v2460 = vmul.f32 %v1970, %v1970
  %v2461 = vmul.f32 %v2161, %v2161
  %v2462 = vmul.f32 %v2163, %v2163
  %v2463 = vmul.f32 %v1974, %v1974
  %v2464 = vmul.f32 %v1976, %v1976
  %v2465 = vmul.f32 %v2167, %v2167
  %v2466 = vmul.f32 %v2169, %v2169
  %v2467 = vmul.f32 %v1978, %v1978
  %v2468 = vmul.f32 %v1980, %v1980
  %v2469 = vmul.f32 %v2171, %v2171
  %v2470 = vmul.f32 %v2173, %v2173
  %v2471 = vmul.f32 %v1984, %v1984
  %v2472 = vmul.f32 %v1986, %v1986
  %v2473 = vmul.f32 %v2177, %v2177
  %v2474 = vmul.f32 %v2179, %v2179
  %v2475 = vmul.f32 %v1988, %v1988
  %v2476 = vmul.f32 %v1990, %v1990
  %v2477 = vmul.f32 %v2181, %v2181
  %v2478 = vmul.f32 %v2183, %v2183
  %v2479 = vmul.f32 %v1994, %v1994
  %v2480 = vmul.f32 %v1996, %v1996
  %v2481 = vmul.f32 %v2187, %v2187
  %v2482 = vmul.f32 %v2189, %v2189
  %v2483 = vmul.f32 %v1998, %v1998
  %v2484 = vmul.f32 %v2000, %v2000
  %v2485 = vmul.f32 %v2191, %v2191
  %v2486 = vmul.f32 %v2193, %v2193
  %v2487 = vmul.f32 %v2004, %v2004
  %v2488 = vmul.f32 %v2006, %v2006
  %v2489 = vmul.f32 %v2197, %v2197
  %v2490 = vmul.f32 %v2199, %v2199
  %v2491 = vmul.f32 %v2008, %v2008
  %v2492 = vmul.f32 %v2010, %v2010
  %v2493 = vmul.f32 %v2201, %v2201
  %v2494 = vmul.f32 %v2203, %v2203
  %v2495 = vmul.f32 %v2014, %v2014
  %v2496 = vmul.f32 %v2016, %v2016
  %v2497 = vmul.f32 %v2207, %v2207
  %v2498 = vmul.f32 %v2209, %v2209
  %v2499 = vmul.f32 %v2018, %v2018
  %v2500 = vmul.f32 %v2020, %v2020
  %v2501 = vmul.f32 %v2211, %v2211
  %v2502 = vmul.f32 %v2213, %v2213
  %v2503 = vmul.f32 %v2024, %v2024
  %v2504 = vmul.f32 %v2026, %v2026
  %v2505 = vmul.f32 %v2217, %v2217
  %v2506 = vmul.f32 %v2219, %v2219
  %v2507 = vmul.f32 %v2028, %v2028
  %v2508 = vmul.f32 %v2030, %v2030
  %v2509 = vmul.f32 %v2221, %v2221
  %v2510 = vmul.f32 %v2223, %v2223
  %v2511 = vmul.f32 %v2034, %v2034
  %v2512 = vmul.f32 %v2036, %v2036
  %v2513 = vmul.f32 %v2227, %v2227
  %v2514 = vmul.f32 %v2229, %v2229
  %v2515 = vmul.f32 %v2038, %v2038
  %v2516 = vmul.f32 %v2040, %v2040
  %v2517 = vmul.f32 %v2231, %v2231
  %v2518 = vmul.f32 %v2233, %v2233
  %v2519 = vmul.f32 %v2044, %v2044
  %v2520 = vmul.f32 %v2046, %v2046
  %v2521 = vmul.f32 %v2237, %v2237
  %v2522 = vmul.f32 %v2239, %v2239
  %v2523 = vmul.f32 %v2048, %v2048
  %v2524 = vmul.f32 %v2050, %v2050
  %v2525 = vmul.f32 %v2241, %v2241
  %v2526 = vmul.f32 %v2243, %v2243
  %v2527 = vadd.f32 %v2399, %v2403
  %v2528 = vadd.f32 %v2527, %v2407
  %v2529 = vadd.f32 %v2528, %v2411
  %v2530 = vadd.f32 %v2529, %v2415
  %v2531 = vadd.f32 %v2530, %v2419
  %v2532 = vadd.f32 %v2531, %v2423
  %v2533 = vadd.f32 %v2532, %v2427
  %v2534 = vadd.f32 %v2533, %v2431
  %v2535 = vadd.f32 %v2534, %v2435
  %v2536 = vadd.f32 %v2535, %v2439
  %v2537 = vadd.f32 %v2536, %v2443
  %v2538 = vadd.f32 %v2537, %v2447
  %v2539 = vadd.f32 %v2538, %v2451
  %v2540 = vadd.f32 %v2539, %v2455
  %v2541 = vadd.f32 %v2540, %v2459
  %v2542 = vadd.f32 %v2541, %v2463
  %v2543 = vadd.f32 %v2542, %v2467
  %v2544 = vadd.f32 %v2543, %v2471
  %v2545 = vadd.f32 %v2544, %v2475
  %v2546 = vadd.f32 %v2545, %v2479
  %v2547 = vadd.f32 %v2546, %v2483
  %v2548 = vadd.f32 %v2547, %v2487
  %v2549 = vadd.f32 %v2548, %v2491
  %v2550 = vadd.f32 %v2549, %v2495
  %v2551 = vadd.f32 %v2550, %v2499
  %v2552 = vadd.f32 %v2551, %v2503
  %v2553 = vadd.f32 %v2552, %v2507
  %v2554 = vadd.f32 %v2553, %v2511
  %v2555 = vadd.f32 %v2554, %v2515
  %v2556 = vadd.f32 %v2555, %v2519
  %v2557 = vadd.f32 %v2556, %v2523
  %v2558 = vrot.slane %v2557, 4
  %v2559 = vadd.f32 %v2557, %v2558
  %v2560 = vrot.slane %v2559, 2
  %v2561 = vadd.f32 %v2559, %v2560
  %v2562 = vrot.slane %v2561, 1
  %v2563 = vadd.f32 %v2561, %v2562
  %v2564 = vadd.f32 %v2400, %v2404
  %v2565 = vadd.f32 %v2564, %v2408
  %v2566 = vadd.f32 %v2565, %v2412
  %v2567 = vadd.f32 %v2566, %v2416
  %v2568 = vadd.f32 %v2567, %v2420
  %v2569 = vadd.f32 %v2568, %v2424
  %v2570 = vadd.f32 %v2569, %v2428
  %v2571 = vadd.f32 %v2570, %v2432
  %v2572 = vadd.f32 %v2571, %v2436
  %v2573 = vadd.f32 %v2572, %v2440
  %v2574 = vadd.f32 %v2573, %v2444
  %v2575 = vadd.f32 %v2574, %v2448
  %v2576 = vadd.f32 %v2575, %v2452
  %v2577 = vadd.f32 %v2576, %v2456
  %v2578 = vadd.f32 %v2577, %v2460
  %v2579 = vadd.f32 %v2578, %v2464
  %v2580 = vadd.f32 %v2579, %v2468
  %v2581 = vadd.f32 %v2580, %v2472
  %v2582 = vadd.f32 %v2581, %v2476
  %v2583 = vadd.f32 %v2582, %v2480
  %v2584 = vadd.f32 %v2583, %v2484
  %v2585 = vadd.f32 %v2584, %v2488
  %v2586 = vadd.f32 %v2585, %v2492
  %v2587 = vadd.f32 %v2586, %v2496
  %v2588 = vadd.f32 %v2587, %v2500
  %v2589 = vadd.f32 %v2588, %v2504
  %v2590 = vadd.f32 %v2589, %v2508
  %v2591 = vadd.f32 %v2590, %v2512
  %v2592 = vadd.f32 %v2591, %v2516
  %v2593 = vadd.f32 %v2592, %v2520
  %v2594 = vadd.f32 %v2593, %v2524
  %v2595 = vrot.slane %v2594, 4
  %v2596 = vadd.f32 %v2594, %v2595
  %v2597 = vrot.slane %v2596, 2
  %v2598 = vadd.f32 %v2596, %v2597
  %v2599 = vrot.slane %v2598, 1
  %v2600 = vadd.f32 %v2598, %v2599
  %v2601 = vadd.f32 %v2401, %v2405
  %v2602 = vadd.f32 %v2601, %v2409
  %v2603 = vadd.f32 %v2602, %v2413
  %v2604 = vadd.f32 %v2603, %v2417
  %v2605 = vadd.f32 %v2604, %v2421
  %v2606 = vadd.f32 %v2605, %v2425
  %v2607 = vadd.f32 %v2606, %v2429
  %v2608 = vadd.f32 %v2607, %v2433
  %v2609 = vadd.f32 %v2608, %v2437
  %v2610 = vadd.f32 %v2609, %v2441
  %v2611 = vadd.f32 %v2610, %v2445
  %v2612 = vadd.f32 %v2611, %v2449
  %v2613 = vadd.f32 %v2612, %v2453
  %v2614 = vadd.f32 %v2613, %v2457
  %v2615 = vadd.f32 %v2614, %v2461
  %v2616 = vadd.f32 %v2615, %v2465
  %v2617 = vadd.f32 %v2616, %v2469
  %v2618 = vadd.f32 %v2617, %v2473
  %v2619 = vadd.f32 %v2618, %v2477
  %v2620 = vadd.f32 %v2619, %v2481
  %v2621 = vadd.f32 %v2620, %v2485
  %v2622 = vadd.f32 %v2621, %v2489
  %v2623 = vadd.f32 %v2622, %v2493
  %v2624 = vadd.f32 %v2623, %v2497
  %v2625 = vadd.f32 %v2624, %v2501
  %v2626 = vadd.f32 %v2625, %v2505
  %v2627 = vadd.f32 %v2626, %v2509
  %v2628 = vadd.f32 %v2627, %v2513
  %v2629 = vadd.f32 %v2628, %v2517
  %v2630 = vadd.f32 %v2629, %v2521
  %v2631 = vadd.f32 %v2630, %v2525
  %v2632 = vrot.slane %v2631, 4
  %v2633 = vadd.f32 %v2631, %v2632
  %v2634 = vrot.slane %v2633, 2
  %v2635 = vadd.f32 %v2633, %v2634
  %v2636 = vrot.slane %v2635, 1
  %v2637 = vadd.f32 %v2635, %v2636
  %v2638 = vadd.f32 %v2402, %v2406
  %v2639 = vadd.f32 %v2638, %v2410
  %v2640 = vadd.f32 %v2639, %v2414
  %v2641 = vadd.f32 %v2640, %v2418
  %v2642 = vadd.f32 %v2641, %v2422
  %v2643 = vadd.f32 %v2642, %v2426
  %v2644 = vadd.f32 %v2643, %v2430
  %v2645 = vadd.f32 %v2644, %v2434
  %v2646 = vadd.f32 %v2645, %v2438
  %v2647 = vadd.f32 %v2646, %v2442
  %v2648 = vadd.f32 %v2647, %v2446
  %v2649 = vadd.f32 %v2648, %v2450
  %v2650 = vadd.f32 %v2649, %v2454
  %v2651 = vadd.f32 %v2650, %v2458
  %v2652 = vadd.f32 %v2651, %v2462
  %v2653 = vadd.f32 %v2652, %v2466
  %v2654 = vadd.f32 %v2653, %v2470
  %v2655 = vadd.f32 %v2654, %v2474
  %v2656 = vadd.f32 %v2655, %v2478
  %v2657 = vadd.f32 %v2656, %v2482
  %v2658 = vadd.f32 %v2657, %v2486
  %v2659 = vadd.f32 %v2658, %v2490
  %v2660 = vadd.f32 %v2659, %v2494
  %v2661 = vadd.f32 %v2660, %v2498
  %v2662 = vadd.f32 %v2661, %v2502
  %v2663 = vadd.f32 %v2662, %v2506
  %v2664 = vadd.f32 %v2663, %v2510
  %v2665 = vadd.f32 %v2664, %v2514
  %v2666 = vadd.f32 %v2665, %v2518
  %v2667 = vadd.f32 %v2666, %v2522
  %v2668 = vadd.f32 %v2667, %v2526
  %v2669 = vrot.slane %v2668, 4
  %v2670 = vadd.f32 %v2668, %v2669
  %v2671 = vrot.slane %v2670, 2
  %v2672 = vadd.f32 %v2670, %v2671
  %v2673 = vrot.slane %v2672, 1
  %v2674 = vadd.f32 %v2672, %v2673
  %v2675 = vmul.f32 %v2563, %v908
  %v2676 = vmul.f32 %v2600, %v908
  %v2677 = vmul.f32 %v2637, %v908
  %v2678 = vmul.f32 %v2674, %v908
  %v2679 = vmul.f32 %v2395, %v2395
  %v2680 = vmul.f32 %v2396, %v2396
  %v2681 = vmul.f32 %v2397, %v2397
  %v2682 = vmul.f32 %v2398, %v2398
  %v2683 = vsub.f32 %v2675, %v2679
  %v2684 = vsub.f32 %v2676, %v2680
  %v2685 = vsub.f32 %v2677, %v2681
  %v2686 = vsub.f32 %v2678, %v2682
  %v2687 = vmax.f32 %v2683, 0.0
  %v2688 = vmax.f32 %v2684, 0.0
  %v2689 = vmax.f32 %v2685, 0.0
  %v2690 = vmax.f32 %v2686, 0.0
  %v2691 = vadd.f32 %v2687, 1e-05
  %v2692 = vadd.f32 %v2688, 1e-05
  %v2693 = vadd.f32 %v2689, 1e-05
  %v2694 = vadd.f32 %v2690, 1e-05
  %v2695 = vrsqrt.pop %v2691
  %v2696 = vrsqrt.pop %v2692
  %v2697 = vrsqrt.pop %v2693
  %v2698 = vrsqrt.pop %v2694
  %v2703 = vcombine.low %v2695, %v2696
  %v2704 = vcombine.low %v2697, %v2698
  %v2706 = vunpack.c.l.s4 1966171168
  %v2707 = vunpack.c.0.s8 %v2706
  %v2708 = vlaneseq
  %v2709 = vshrl.u32 %v2708, 7
  %v2710 = vsub.s32 %v2707, %v2709
  %v2711 = vrot.slane %v2703, %v2710
  %v2713 = vunpack.c.l.s4 1966171168
  %v2714 = vunpack.c.0.s8 %v2713
  %v2715 = vlaneseq
  %v2716 = vshrl.u32 %v2715, 7
  %v2717 = vsub.s32 %v2714, %v2716
  %v2718 = vrot.slane %v2704, %v2717
  %v2719 = vcombine.low %v2711, %v2718
  %v2721 = vunpack.c.l.s4 1966171168
  %v2722 = vunpack.c.0.s8 %v2721
  %v2723 = vlaneseq
  %v2724 = vshrl.u32 %v2723, 7
  %v2725 = vsub.s32 %v2722, %v2724
  %v2726 = vrot.slane %v2719, %v2725
  %v2728 = vmul.f32 %v2245, %v2726
  %v2730 = vlaneseq
  %v2731 = vshrl.u32 %v2730, 7
  %v2732 = vsub.s32 0, %v2731
  %v2733 = vrot.slane %v2728, %v2732
  %v2734 = vlaneseq
  %v2735 = vshrl.u32 %v2734, 7
  %v2736 = vsub.s32 1, %v2735
  %v2737 = vrot.slane %v2728, %v2736
  %v2738 = vlaneseq
  %v2739 = vshrl.u32 %v2738, 7
  %v2740 = vsub.s32 2, %v2739
  %v2741 = vrot.slane %v2728, %v2740
  %v2742 = vlaneseq
  %v2743 = vshrl.u32 %v2742, 7
  %v2744 = vsub.s32 3, %v2743
  %v2745 = vrot.slane %v2728, %v2744
  %v2750 = vmul.f32 %v2395, %v2733
  %v2751 = vmul.f32 %v2396, %v2737
  %v2752 = vmul.f32 %v2397, %v2741
  %v2753 = vmul.f32 %v2398, %v2745
  %v2758 = vcombine.low %v2750, %v2751
  %v2759 = vcombine.low %v2752, %v2753
  %v2761 = vunpack.c.l.s4 1966171168
  %v2762 = vunpack.c.0.s8 %v2761
  %v2763 = vlaneseq
  %v2764 = vshrl.u32 %v2763, 7
  %v2765 = vsub.s32 %v2762, %v2764
  %v2766 = vrot.slane %v2758, %v2765
  %v2768 = vunpack.c.l.s4 1966171168
  %v2769 = vunpack.c.0.s8 %v2768
  %v2770 = vlaneseq
  %v2771 = vshrl.u32 %v2770, 7
  %v2772 = vsub.s32 %v2769, %v2771
  %v2773 = vrot.slane %v2759, %v2772
  %v2774 = vcombine.low %v2766, %v2773
  %v2776 = vunpack.c.l.s4 1966171168
  %v2777 = vunpack.c.0.s8 %v2776
  %v2778 = vlaneseq
  %v2779 = vshrl.u32 %v2778, 7
  %v2780 = vsub.s32 %v2777, %v2779
  %v2781 = vrot.slane %v2774, %v2780
  %v2783 = vsub.f32 %v2246, %v2781
  %v2784 = vmul.f32 %v1894, %v2733
  %v2785 = vmul.f32 %v1896, %v2737
  %v2786 = vmul.f32 %v2087, %v2741
  %v2787 = vmul.f32 %v2089, %v2745
  %v2788 = vmul.f32 %v1898, %v2733
  %v2789 = vmul.f32 %v1900, %v2737
  %v2790 = vmul.f32 %v2091, %v2741
  %v2791 = vmul.f32 %v2093, %v2745
  %v2792 = vmul.f32 %v1904, %v2733
  %v2793 = vmul.f32 %v1906, %v2737
  %v2794 = vmul.f32 %v2097, %v2741
  %v2795 = vmul.f32 %v2099, %v2745
  %v2796 = vmul.f32 %v1908, %v2733
  %v2797 = vmul.f32 %v1910, %v2737
  %v2798 = vmul.f32 %v2101, %v2741
  %v2799 = vmul.f32 %v2103, %v2745
  %v2800 = vmul.f32 %v1914, %v2733
  %v2801 = vmul.f32 %v1916, %v2737
  %v2802 = vmul.f32 %v2107, %v2741
  %v2803 = vmul.f32 %v2109, %v2745
  %v2804 = vmul.f32 %v1918, %v2733
  %v2805 = vmul.f32 %v1920, %v2737
  %v2806 = vmul.f32 %v2111, %v2741
  %v2807 = vmul.f32 %v2113, %v2745
  %v2808 = vmul.f32 %v1924, %v2733
  %v2809 = vmul.f32 %v1926, %v2737
  %v2810 = vmul.f32 %v2117, %v2741
  %v2811 = vmul.f32 %v2119, %v2745
  %v2812 = vmul.f32 %v1928, %v2733
  %v2813 = vmul.f32 %v1930, %v2737
  %v2814 = vmul.f32 %v2121, %v2741
  %v2815 = vmul.f32 %v2123, %v2745
  %v2816 = vmul.f32 %v1934, %v2733
  %v2817 = vmul.f32 %v1936, %v2737
  %v2818 = vmul.f32 %v2127, %v2741
  %v2819 = vmul.f32 %v2129, %v2745
  %v2820 = vmul.f32 %v1938, %v2733
  %v2821 = vmul.f32 %v1940, %v2737
  %v2822 = vmul.f32 %v2131, %v2741
  %v2823 = vmul.f32 %v2133, %v2745
  %v2824 = vmul.f32 %v1944, %v2733
  %v2825 = vmul.f32 %v1946, %v2737
  %v2826 = vmul.f32 %v2137, %v2741
  %v2827 = vmul.f32 %v2139, %v2745
  %v2828 = vmul.f32 %v1948, %v2733
  %v2829 = vmul.f32 %v1950, %v2737
  %v2830 = vmul.f32 %v2141, %v2741
  %v2831 = vmul.f32 %v2143, %v2745
  %v2832 = vmul.f32 %v1954, %v2733
  %v2833 = vmul.f32 %v1956, %v2737
  %v2834 = vmul.f32 %v2147, %v2741
  %v2835 = vmul.f32 %v2149, %v2745
  %v2836 = vmul.f32 %v1958, %v2733
  %v2837 = vmul.f32 %v1960, %v2737
  %v2838 = vmul.f32 %v2151, %v2741
  %v2839 = vmul.f32 %v2153, %v2745
  %v2840 = vmul.f32 %v1964, %v2733
  %v2841 = vmul.f32 %v1966, %v2737
  %v2842 = vmul.f32 %v2157, %v2741
  %v2843 = vmul.f32 %v2159, %v2745
  %v2844 = vmul.f32 %v1968, %v2733
  %v2845 = vmul.f32 %v1970, %v2737
  %v2846 = vmul.f32 %v2161, %v2741
  %v2847 = vmul.f32 %v2163, %v2745
  %v2848 = vmul.f32 %v1974, %v2733
  %v2849 = vmul.f32 %v1976, %v2737
  %v2850 = vmul.f32 %v2167, %v2741
  %v2851 = vmul.f32 %v2169, %v2745
  %v2852 = vmul.f32 %v1978, %v2733
  %v2853 = vmul.f32 %v1980, %v2737
  %v2854 = vmul.f32 %v2171, %v2741
  %v2855 = vmul.f32 %v2173, %v2745
  %v2856 = vmul.f32 %v1984, %v2733
  %v2857 = vmul.f32 %v1986, %v2737
  %v2858 = vmul.f32 %v2177, %v2741
  %v2859 = vmul.f32 %v2179, %v2745
  %v2860 = vmul.f32 %v1988, %v2733
  %v2861 = vmul.f32 %v1990, %v2737
  %v2862 = vmul.f32 %v2181, %v2741
  %v2863 = vmul.f32 %v2183, %v2745
  %v2864 = vmul.f32 %v1994, %v2733
  %v2865 = vmul.f32 %v1996, %v2737
  %v2866 = vmul.f32 %v2187, %v2741
  %v2867 = vmul.f32 %v2189, %v2745
  %v2868 = vmul.f32 %v1998, %v2733
  %v2869 = vmul.f32 %v2000, %v2737
  %v2870 = vmul.f32 %v2191, %v2741
  %v2871 = vmul.f32 %v2193, %v2745
  %v2872 = vmul.f32 %v2004, %v2733
  %v2873 = vmul.f32 %v2006, %v2737
  %v2874 = vmul.f32 %v2197, %v2741
  %v2875 = vmul.f32 %v2199, %v2745
  %v2876 = vmul.f32 %v2008, %v2733
  %v2877 = vmul.f32 %v2010, %v2737
  %v2878 = vmul.f32 %v2201, %v2741
  %v2879 = vmul.f32 %v2203, %v2745
  %v2880 = vmul.f32 %v2014, %v2733
  %v2881 = vmul.f32 %v2016, %v2737
  %v2882 = vmul.f32 %v2207, %v2741
  %v2883 = vmul.f32 %v2209, %v2745
  %v2884 = vmul.f32 %v2018, %v2733
  %v2885 = vmul.f32 %v2020, %v2737
  %v2886 = vmul.f32 %v2211, %v2741
  %v2887 = vmul.f32 %v2213, %v2745
  %v2888 = vmul.f32 %v2024, %v2733
  %v2889 = vmul.f32 %v2026, %v2737
  %v2890 = vmul.f32 %v2217, %v2741
  %v2891 = vmul.f32 %v2219, %v2745
  %v2892 = vmul.f32 %v2028, %v2733
  %v2893 = vmul.f32 %v2030, %v2737
  %v2894 = vmul.f32 %v2221, %v2741
  %v2895 = vmul.f32 %v2223, %v2745
  %v2896 = vmul.f32 %v2034, %v2733
  %v2897 = vmul.f32 %v2036, %v2737
  %v2898 = vmul.f32 %v2227, %v2741
  %v2899 = vmul.f32 %v2229, %v2745
  %v2900 = vmul.f32 %v2038, %v2733
  %v2901 = vmul.f32 %v2040, %v2737
  %v2902 = vmul.f32 %v2231, %v2741
  %v2903 = vmul.f32 %v2233, %v2745
  %v2904 = vmul.f32 %v2044, %v2733
  %v2905 = vmul.f32 %v2046, %v2737
  %v2906 = vmul.f32 %v2237, %v2741
  %v2907 = vmul.f32 %v2239, %v2745
  %v2908 = vmul.f32 %v2048, %v2733
  %v2909 = vmul.f32 %v2050, %v2737
  %v2910 = vmul.f32 %v2241, %v2741
  %v2911 = vmul.f32 %v2243, %v2745
  %v2913 = vlaneseq
  %v2914 = vshrl.u32 %v2913, 7
  %v2915 = vsub.s32 0, %v2914
  %v2916 = vrot.slane %v2783, %v2915
  %v2917 = vlaneseq
  %v2918 = vshrl.u32 %v2917, 7
  %v2919 = vsub.s32 1, %v2918
  %v2920 = vrot.slane %v2783, %v2919
  %v2921 = vlaneseq
  %v2922 = vshrl.u32 %v2921, 7
  %v2923 = vsub.s32 2, %v2922
  %v2924 = vrot.slane %v2783, %v2923
  %v2925 = vlaneseq
  %v2926 = vshrl.u32 %v2925, 7
  %v2927 = vsub.s32 3, %v2926
  %v2928 = vrot.slane %v2783, %v2927
  %v2933 = vadd.f32 %v2784, %v2916
  %v2934 = vadd.f32 %v2785, %v2920
  %v2935 = vadd.f32 %v2786, %v2924
  %v2936 = vadd.f32 %v2787, %v2928
  %v2937 = vadd.f32 %v2788, %v2916
  %v2938 = vadd.f32 %v2789, %v2920
  %v2939 = vadd.f32 %v2790, %v2924
  %v2940 = vadd.f32 %v2791, %v2928
  %v2941 = vadd.f32 %v2792, %v2916
  %v2942 = vadd.f32 %v2793, %v2920
  %v2943 = vadd.f32 %v2794, %v2924
  %v2944 = vadd.f32 %v2795, %v2928
  %v2945 = vadd.f32 %v2796, %v2916
  %v2946 = vadd.f32 %v2797, %v2920
  %v2947 = vadd.f32 %v2798, %v2924
  %v2948 = vadd.f32 %v2799, %v2928
  %v2949 = vadd.f32 %v2800, %v2916
  %v2950 = vadd.f32 %v2801, %v2920
  %v2951 = vadd.f32 %v2802, %v2924
  %v2952 = vadd.f32 %v2803, %v2928
  %v2953 = vadd.f32 %v2804, %v2916
  %v2954 = vadd.f32 %v2805, %v2920
  %v2955 = vadd.f32 %v2806, %v2924
  %v2956 = vadd.f32 %v2807, %v2928
  %v2957 = vadd.f32 %v2808, %v2916
  %v2958 = vadd.f32 %v2809, %v2920
  %v2959 = vadd.f32 %v2810, %v2924
  %v2960 = vadd.f32 %v2811, %v2928
  %v2961 = vadd.f32 %v2812, %v2916
  %v2962 = vadd.f32 %v2813, %v2920
  %v2963 = vadd.f32 %v2814, %v2924
  %v2964 = vadd.f32 %v2815, %v2928
  %v2965 = vadd.f32 %v2816, %v2916
  %v2966 = vadd.f32 %v2817, %v2920
  %v2967 = vadd.f32 %v2818, %v2924
  %v2968 = vadd.f32 %v2819, %v2928
  %v2969 = vadd.f32 %v2820, %v2916
  %v2970 = vadd.f32 %v2821, %v2920
  %v2971 = vadd.f32 %v2822, %v2924
  %v2972 = vadd.f32 %v2823, %v2928
  %v2973 = vadd.f32 %v2824, %v2916
  %v2974 = vadd.f32 %v2825, %v2920
  %v2975 = vadd.f32 %v2826, %v2924
  %v2976 = vadd.f32 %v2827, %v2928
  %v2977 = vadd.f32 %v2828, %v2916
  %v2978 = vadd.f32 %v2829, %v2920
  %v2979 = vadd.f32 %v2830, %v2924
  %v2980 = vadd.f32 %v2831, %v2928
  %v2981 = vadd.f32 %v2832, %v2916
  %v2982 = vadd.f32 %v2833, %v2920
  %v2983 = vadd.f32 %v2834, %v2924
  %v2984 = vadd.f32 %v2835, %v2928
  %v2985 = vadd.f32 %v2836, %v2916
  %v2986 = vadd.f32 %v2837, %v2920
  %v2987 = vadd.f32 %v2838, %v2924
  %v2988 = vadd.f32 %v2839, %v2928
  %v2989 = vadd.f32 %v2840, %v2916
  %v2990 = vadd.f32 %v2841, %v2920
  %v2991 = vadd.f32 %v2842, %v2924
  %v2992 = vadd.f32 %v2843, %v2928
  %v2993 = vadd.f32 %v2844, %v2916
  %v2994 = vadd.f32 %v2845, %v2920
  %v2995 = vadd.f32 %v2846, %v2924
  %v2996 = vadd.f32 %v2847, %v2928
  %v2997 = vadd.f32 %v2848, %v2916
  %v2998 = vadd.f32 %v2849, %v2920
  %v2999 = vadd.f32 %v2850, %v2924
  %v3000 = vadd.f32 %v2851, %v2928
  %v3001 = vadd.f32 %v2852, %v2916
  %v3002 = vadd.f32 %v2853, %v2920
  %v3003 = vadd.f32 %v2854, %v2924
  %v3004 = vadd.f32 %v2855, %v2928
  %v3005 = vadd.f32 %v2856, %v2916
  %v3006 = vadd.f32 %v2857, %v2920
  %v3007 = vadd.f32 %v2858, %v2924
  %v3008 = vadd.f32 %v2859, %v2928
  %v3009 = vadd.f32 %v2860, %v2916
  %v3010 = vadd.f32 %v2861, %v2920
  %v3011 = vadd.f32 %v2862, %v2924
  %v3012 = vadd.f32 %v2863, %v2928
  %v3013 = vadd.f32 %v2864, %v2916
  %v3014 = vadd.f32 %v2865, %v2920
  %v3015 = vadd.f32 %v2866, %v2924
  %v3016 = vadd.f32 %v2867, %v2928
  %v3017 = vadd.f32 %v2868, %v2916
  %v3018 = vadd.f32 %v2869, %v2920
  %v3019 = vadd.f32 %v2870, %v2924
  %v3020 = vadd.f32 %v2871, %v2928
  %v3021 = vadd.f32 %v2872, %v2916
  %v3022 = vadd.f32 %v2873, %v2920
  %v3023 = vadd.f32 %v2874, %v2924
  %v3024 = vadd.f32 %v2875, %v2928
  %v3025 = vadd.f32 %v2876, %v2916
  %v3026 = vadd.f32 %v2877, %v2920
  %v3027 = vadd.f32 %v2878, %v2924
  %v3028 = vadd.f32 %v2879, %v2928
  %v3029 = vadd.f32 %v2880, %v2916
  %v3030 = vadd.f32 %v2881, %v2920
  %v3031 = vadd.f32 %v2882, %v2924
  %v3032 = vadd.f32 %v2883, %v2928
  %v3033 = vadd.f32 %v2884, %v2916
  %v3034 = vadd.f32 %v2885, %v2920
  %v3035 = vadd.f32 %v2886, %v2924
  %v3036 = vadd.f32 %v2887, %v2928
  %v3037 = vadd.f32 %v2888, %v2916
  %v3038 = vadd.f32 %v2889, %v2920
  %v3039 = vadd.f32 %v2890, %v2924
  %v3040 = vadd.f32 %v2891, %v2928
  %v3041 = vadd.f32 %v2892, %v2916
  %v3042 = vadd.f32 %v2893, %v2920
  %v3043 = vadd.f32 %v2894, %v2924
  %v3044 = vadd.f32 %v2895, %v2928
  %v3045 = vadd.f32 %v2896, %v2916
  %v3046 = vadd.f32 %v2897, %v2920
  %v3047 = vadd.f32 %v2898, %v2924
  %v3048 = vadd.f32 %v2899, %v2928
  %v3049 = vadd.f32 %v2900, %v2916
  %v3050 = vadd.f32 %v2901, %v2920
  %v3051 = vadd.f32 %v2902, %v2924
  %v3052 = vadd.f32 %v2903, %v2928
  %v3053 = vadd.f32 %v2904, %v2916
  %v3054 = vadd.f32 %v2905, %v2920
  %v3055 = vadd.f32 %v2906, %v2924
  %v3056 = vadd.f32 %v2907, %v2928
  %v3057 = vadd.f32 %v2908, %v2916
  %v3058 = vadd.f32 %v2909, %v2920
  %v3059 = vadd.f32 %v2910, %v2924
  %v3060 = vadd.f32 %v2911, %v2928
  %vm3061 = vcmp.gt.f32.partialorder %v2933, 0.0
  %vm3062 = vcmp.gt.f32.partialorder %v2934, 0.0
  %vm3063 = vcmp.gt.f32.partialorder %v2935, 0.0
  %vm3064 = vcmp.gt.f32.partialorder %v2936, 0.0
  %vm3065 = vcmp.gt.f32.partialorder %v2937, 0.0
  %vm3066 = vcmp.gt.f32.partialorder %v2938, 0.0
  %vm3067 = vcmp.gt.f32.partialorder %v2939, 0.0
  %vm3068 = vcmp.gt.f32.partialorder %v2940, 0.0
  %vm3069 = vcmp.gt.f32.partialorder %v2941, 0.0
  %vm3070 = vcmp.gt.f32.partialorder %v2942, 0.0
  %vm3071 = vcmp.gt.f32.partialorder %v2943, 0.0
  %vm3072 = vcmp.gt.f32.partialorder %v2944, 0.0
  %vm3073 = vcmp.gt.f32.partialorder %v2945, 0.0
  %vm3074 = vcmp.gt.f32.partialorder %v2946, 0.0
  %vm3075 = vcmp.gt.f32.partialorder %v2947, 0.0
  %vm3076 = vcmp.gt.f32.partialorder %v2948, 0.0
  %vm3077 = vcmp.gt.f32.partialorder %v2949, 0.0
  %vm3078 = vcmp.gt.f32.partialorder %v2950, 0.0
  %vm3079 = vcmp.gt.f32.partialorder %v2951, 0.0
  %vm3080 = vcmp.gt.f32.partialorder %v2952, 0.0
  %vm3081 = vcmp.gt.f32.partialorder %v2953, 0.0
  %vm3082 = vcmp.gt.f32.partialorder %v2954, 0.0
  %vm3083 = vcmp.gt.f32.partialorder %v2955, 0.0
  %vm3084 = vcmp.gt.f32.partialorder %v2956, 0.0
  %vm3085 = vcmp.gt.f32.partialorder %v2957, 0.0
  %vm3086 = vcmp.gt.f32.partialorder %v2958, 0.0
  %vm3087 = vcmp.gt.f32.partialorder %v2959, 0.0
  %vm3088 = vcmp.gt.f32.partialorder %v2960, 0.0
  %vm3089 = vcmp.gt.f32.partialorder %v2961, 0.0
  %vm3090 = vcmp.gt.f32.partialorder %v2962, 0.0
  %vm3091 = vcmp.gt.f32.partialorder %v2963, 0.0
  %vm3092 = vcmp.gt.f32.partialorder %v2964, 0.0
  %vm3093 = vcmp.gt.f32.partialorder %v2965, 0.0
  %vm3094 = vcmp.gt.f32.partialorder %v2966, 0.0
  %vm3095 = vcmp.gt.f32.partialorder %v2967, 0.0
  %vm3096 = vcmp.gt.f32.partialorder %v2968, 0.0
  %vm3097 = vcmp.gt.f32.partialorder %v2969, 0.0
  %vm3098 = vcmp.gt.f32.partialorder %v2970, 0.0
  %vm3099 = vcmp.gt.f32.partialorder %v2971, 0.0
  %vm3100 = vcmp.gt.f32.partialorder %v2972, 0.0
  %vm3101 = vcmp.gt.f32.partialorder %v2973, 0.0
  %vm3102 = vcmp.gt.f32.partialorder %v2974, 0.0
  %vm3103 = vcmp.gt.f32.partialorder %v2975, 0.0
  %vm3104 = vcmp.gt.f32.partialorder %v2976, 0.0
  %vm3105 = vcmp.gt.f32.partialorder %v2977, 0.0
  %vm3106 = vcmp.gt.f32.partialorder %v2978, 0.0
  %vm3107 = vcmp.gt.f32.partialorder %v2979, 0.0
  %vm3108 = vcmp.gt.f32.partialorder %v2980, 0.0
  %vm3109 = vcmp.gt.f32.partialorder %v2981, 0.0
  %vm3110 = vcmp.gt.f32.partialorder %v2982, 0.0
  %vm3111 = vcmp.gt.f32.partialorder %v2983, 0.0
  %vm3112 = vcmp.gt.f32.partialorder %v2984, 0.0
  %vm3113 = vcmp.gt.f32.partialorder %v2985, 0.0
  %vm3114 = vcmp.gt.f32.partialorder %v2986, 0.0
  %vm3115 = vcmp.gt.f32.partialorder %v2987, 0.0
  %vm3116 = vcmp.gt.f32.partialorder %v2988, 0.0
  %vm3117 = vcmp.gt.f32.partialorder %v2989, 0.0
  %vm3118 = vcmp.gt.f32.partialorder %v2990, 0.0
  %vm3119 = vcmp.gt.f32.partialorder %v2991, 0.0
  %vm3120 = vcmp.gt.f32.partialorder %v2992, 0.0
  %vm3121 = vcmp.gt.f32.partialorder %v2993, 0.0
  %vm3122 = vcmp.gt.f32.partialorder %v2994, 0.0
  %vm3123 = vcmp.gt.f32.partialorder %v2995, 0.0
  %vm3124 = vcmp.gt.f32.partialorder %v2996, 0.0
  %vm3125 = vcmp.gt.f32.partialorder %v2997, 0.0
  %vm3126 = vcmp.gt.f32.partialorder %v2998, 0.0
  %vm3127 = vcmp.gt.f32.partialorder %v2999, 0.0
  %vm3128 = vcmp.gt.f32.partialorder %v3000, 0.0
  %vm3129 = vcmp.gt.f32.partialorder %v3001, 0.0
  %vm3130 = vcmp.gt.f32.partialorder %v3002, 0.0
  %vm3131 = vcmp.gt.f32.partialorder %v3003, 0.0
  %vm3132 = vcmp.gt.f32.partialorder %v3004, 0.0
  %vm3133 = vcmp.gt.f32.partialorder %v3005, 0.0
  %vm3134 = vcmp.gt.f32.partialorder %v3006, 0.0
  %vm3135 = vcmp.gt.f32.partialorder %v3007, 0.0
  %vm3136 = vcmp.gt.f32.partialorder %v3008, 0.0
  %vm3137 = vcmp.gt.f32.partialorder %v3009, 0.0
  %vm3138 = vcmp.gt.f32.partialorder %v3010, 0.0
  %vm3139 = vcmp.gt.f32.partialorder %v3011, 0.0
  %vm3140 = vcmp.gt.f32.partialorder %v3012, 0.0
  %vm3141 = vcmp.gt.f32.partialorder %v3013, 0.0
  %vm3142 = vcmp.gt.f32.partialorder %v3014, 0.0
  %vm3143 = vcmp.gt.f32.partialorder %v3015, 0.0
  %vm3144 = vcmp.gt.f32.partialorder %v3016, 0.0
  %vm3145 = vcmp.gt.f32.partialorder %v3017, 0.0
  %vm3146 = vcmp.gt.f32.partialorder %v3018, 0.0
  %vm3147 = vcmp.gt.f32.partialorder %v3019, 0.0
  %vm3148 = vcmp.gt.f32.partialorder %v3020, 0.0
  %vm3149 = vcmp.gt.f32.partialorder %v3021, 0.0
  %vm3150 = vcmp.gt.f32.partialorder %v3022, 0.0
  %vm3151 = vcmp.gt.f32.partialorder %v3023, 0.0
  %vm3152 = vcmp.gt.f32.partialorder %v3024, 0.0
  %vm3153 = vcmp.gt.f32.partialorder %v3025, 0.0
  %vm3154 = vcmp.gt.f32.partialorder %v3026, 0.0
  %vm3155 = vcmp.gt.f32.partialorder %v3027, 0.0
  %vm3156 = vcmp.gt.f32.partialorder %v3028, 0.0
  %vm3157 = vcmp.gt.f32.partialorder %v3029, 0.0
  %vm3158 = vcmp.gt.f32.partialorder %v3030, 0.0
  %vm3159 = vcmp.gt.f32.partialorder %v3031, 0.0
  %vm3160 = vcmp.gt.f32.partialorder %v3032, 0.0
  %vm3161 = vcmp.gt.f32.partialorder %v3033, 0.0
  %vm3162 = vcmp.gt.f32.partialorder %v3034, 0.0
  %vm3163 = vcmp.gt.f32.partialorder %v3035, 0.0
  %vm3164 = vcmp.gt.f32.partialorder %v3036, 0.0
  %vm3165 = vcmp.gt.f32.partialorder %v3037, 0.0
  %vm3166 = vcmp.gt.f32.partialorder %v3038, 0.0
  %vm3167 = vcmp.gt.f32.partialorder %v3039, 0.0
  %vm3168 = vcmp.gt.f32.partialorder %v3040, 0.0
  %vm3169 = vcmp.gt.f32.partialorder %v3041, 0.0
  %vm3170 = vcmp.gt.f32.partialorder %v3042, 0.0
  %vm3171 = vcmp.gt.f32.partialorder %v3043, 0.0
  %vm3172 = vcmp.gt.f32.partialorder %v3044, 0.0
  %vm3173 = vcmp.gt.f32.partialorder %v3045, 0.0
  %vm3174 = vcmp.gt.f32.partialorder %v3046, 0.0
  %vm3175 = vcmp.gt.f32.partialorder %v3047, 0.0
  %vm3176 = vcmp.gt.f32.partialorder %v3048, 0.0
  %vm3177 = vcmp.gt.f32.partialorder %v3049, 0.0
  %vm3178 = vcmp.gt.f32.partialorder %v3050, 0.0
  %vm3179 = vcmp.gt.f32.partialorder %v3051, 0.0
  %vm3180 = vcmp.gt.f32.partialorder %v3052, 0.0
  %vm3181 = vcmp.gt.f32.partialorder %v3053, 0.0
  %vm3182 = vcmp.gt.f32.partialorder %v3054, 0.0
  %vm3183 = vcmp.gt.f32.partialorder %v3055, 0.0
  %vm3184 = vcmp.gt.f32.partialorder %v3056, 0.0
  %vm3185 = vcmp.gt.f32.partialorder %v3057, 0.0
  %vm3186 = vcmp.gt.f32.partialorder %v3058, 0.0
  %vm3187 = vcmp.gt.f32.partialorder %v3059, 0.0
  %vm3188 = vcmp.gt.f32.partialorder %v3060, 0.0
  %v3189 = vmul.f32 %v2933, 0.2
  %v3190 = vmul.f32 %v2934, 0.2
  %v3191 = vmul.f32 %v2935, 0.2
  %v3192 = vmul.f32 %v2936, 0.2
  %v3193 = vmul.f32 %v2937, 0.2
  %v3194 = vmul.f32 %v2938, 0.2
  %v3195 = vmul.f32 %v2939, 0.2
  %v3196 = vmul.f32 %v2940, 0.2
  %v3197 = vmul.f32 %v2941, 0.2
  %v3198 = vmul.f32 %v2942, 0.2
  %v3199 = vmul.f32 %v2943, 0.2
  %v3200 = vmul.f32 %v2944, 0.2
  %v3201 = vmul.f32 %v2945, 0.2
  %v3202 = vmul.f32 %v2946, 0.2
  %v3203 = vmul.f32 %v2947, 0.2
  %v3204 = vmul.f32 %v2948, 0.2
  %v3205 = vmul.f32 %v2949, 0.2
  %v3206 = vmul.f32 %v2950, 0.2
  %v3207 = vmul.f32 %v2951, 0.2
  %v3208 = vmul.f32 %v2952, 0.2
  %v3209 = vmul.f32 %v2953, 0.2
  %v3210 = vmul.f32 %v2954, 0.2
  %v3211 = vmul.f32 %v2955, 0.2
  %v3212 = vmul.f32 %v2956, 0.2
  %v3213 = vmul.f32 %v2957, 0.2
  %v3214 = vmul.f32 %v2958, 0.2
  %v3215 = vmul.f32 %v2959, 0.2
  %v3216 = vmul.f32 %v2960, 0.2
  %v3217 = vmul.f32 %v2961, 0.2
  %v3218 = vmul.f32 %v2962, 0.2
  %v3219 = vmul.f32 %v2963, 0.2
  %v3220 = vmul.f32 %v2964, 0.2
  %v3221 = vmul.f32 %v2965, 0.2
  %v3222 = vmul.f32 %v2966, 0.2
  %v3223 = vmul.f32 %v2967, 0.2
  %v3224 = vmul.f32 %v2968, 0.2
  %v3225 = vmul.f32 %v2969, 0.2
  %v3226 = vmul.f32 %v2970, 0.2
  %v3227 = vmul.f32 %v2971, 0.2
  %v3228 = vmul.f32 %v2972, 0.2
  %v3229 = vmul.f32 %v2973, 0.2
  %v3230 = vmul.f32 %v2974, 0.2
  %v3231 = vmul.f32 %v2975, 0.2
  %v3232 = vmul.f32 %v2976, 0.2
  %v3233 = vmul.f32 %v2977, 0.2
  %v3234 = vmul.f32 %v2978, 0.2
  %v3235 = vmul.f32 %v2979, 0.2
  %v3236 = vmul.f32 %v2980, 0.2
  %v3237 = vmul.f32 %v2981, 0.2
  %v3238 = vmul.f32 %v2982, 0.2
  %v3239 = vmul.f32 %v2983, 0.2
  %v3240 = vmul.f32 %v2984, 0.2
  %v3241 = vmul.f32 %v2985, 0.2
  %v3242 = vmul.f32 %v2986, 0.2
  %v3243 = vmul.f32 %v2987, 0.2
  %v3244 = vmul.f32 %v2988, 0.2
  %v3245 = vmul.f32 %v2989, 0.2
  %v3246 = vmul.f32 %v2990, 0.2
  %v3247 = vmul.f32 %v2991, 0.2
  %v3248 = vmul.f32 %v2992, 0.2
  %v3249 = vmul.f32 %v2993, 0.2
  %v3250 = vmul.f32 %v2994, 0.2
  %v3251 = vmul.f32 %v2995, 0.2
  %v3252 = vmul.f32 %v2996, 0.2
  %v3253 = vmul.f32 %v2997, 0.2
  %v3254 = vmul.f32 %v2998, 0.2
  %v3255 = vmul.f32 %v2999, 0.2
  %v3256 = vmul.f32 %v3000, 0.2
  %v3257 = vmul.f32 %v3001, 0.2
  %v3258 = vmul.f32 %v3002, 0.2
  %v3259 = vmul.f32 %v3003, 0.2
  %v3260 = vmul.f32 %v3004, 0.2
  %v3261 = vmul.f32 %v3005, 0.2
  %v3262 = vmul.f32 %v3006, 0.2
  %v3263 = vmul.f32 %v3007, 0.2
  %v3264 = vmul.f32 %v3008, 0.2
  %v3265 = vmul.f32 %v3009, 0.2
  %v3266 = vmul.f32 %v3010, 0.2
  %v3267 = vmul.f32 %v3011, 0.2
  %v3268 = vmul.f32 %v3012, 0.2
  %v3269 = vmul.f32 %v3013, 0.2
  %v3270 = vmul.f32 %v3014, 0.2
  %v3271 = vmul.f32 %v3015, 0.2
  %v3272 = vmul.f32 %v3016, 0.2
  %v3273 = vmul.f32 %v3017, 0.2
  %v3274 = vmul.f32 %v3018, 0.2
  %v3275 = vmul.f32 %v3019, 0.2
  %v3276 = vmul.f32 %v3020, 0.2
  %v3277 = vmul.f32 %v3021, 0.2
  %v3278 = vmul.f32 %v3022, 0.2
  %v3279 = vmul.f32 %v3023, 0.2
  %v3280 = vmul.f32 %v3024, 0.2
  %v3281 = vmul.f32 %v3025, 0.2
  %v3282 = vmul.f32 %v3026, 0.2
  %v3283 = vmul.f32 %v3027, 0.2
  %v3284 = vmul.f32 %v3028, 0.2
  %v3285 = vmul.f32 %v3029, 0.2
  %v3286 = vmul.f32 %v3030, 0.2
  %v3287 = vmul.f32 %v3031, 0.2
  %v3288 = vmul.f32 %v3032, 0.2
  %v3289 = vmul.f32 %v3033, 0.2
  %v3290 = vmul.f32 %v3034, 0.2
  %v3291 = vmul.f32 %v3035, 0.2
  %v3292 = vmul.f32 %v3036, 0.2
  %v3293 = vmul.f32 %v3037, 0.2
  %v3294 = vmul.f32 %v3038, 0.2
  %v3295 = vmul.f32 %v3039, 0.2
  %v3296 = vmul.f32 %v3040, 0.2
  %v3297 = vmul.f32 %v3041, 0.2
  %v3298 = vmul.f32 %v3042, 0.2
  %v3299 = vmul.f32 %v3043, 0.2
  %v3300 = vmul.f32 %v3044, 0.2
  %v3301 = vmul.f32 %v3045, 0.2
  %v3302 = vmul.f32 %v3046, 0.2
  %v3303 = vmul.f32 %v3047, 0.2
  %v3304 = vmul.f32 %v3048, 0.2
  %v3305 = vmul.f32 %v3049, 0.2
  %v3306 = vmul.f32 %v3050, 0.2
  %v3307 = vmul.f32 %v3051, 0.2
  %v3308 = vmul.f32 %v3052, 0.2
  %v3309 = vmul.f32 %v3053, 0.2
  %v3310 = vmul.f32 %v3054, 0.2
  %v3311 = vmul.f32 %v3055, 0.2
  %v3312 = vmul.f32 %v3056, 0.2
  %v3313 = vmul.f32 %v3057, 0.2
  %v3314 = vmul.f32 %v3058, 0.2
  %v3315 = vmul.f32 %v3059, 0.2
  %v3316 = vmul.f32 %v3060, 0.2
  %v3317 = vsel %vm3061, %v2933, %v3189
  %v3318 = vsel %vm3062, %v2934, %v3190
  %v3319 = vsel %vm3063, %v2935, %v3191
  %v3320 = vsel %vm3064, %v2936, %v3192
  %v3321 = vsel %vm3065, %v2937, %v3193
  %v3322 = vsel %vm3066, %v2938, %v3194
  %v3323 = vsel %vm3067, %v2939, %v3195
  %v3324 = vsel %vm3068, %v2940, %v3196
  %v3325 = vsel %vm3069, %v2941, %v3197
  %v3326 = vsel %vm3070, %v2942, %v3198
  %v3327 = vsel %vm3071, %v2943, %v3199
  %v3328 = vsel %vm3072, %v2944, %v3200
  %v3329 = vsel %vm3073, %v2945, %v3201
  %v3330 = vsel %vm3074, %v2946, %v3202
  %v3331 = vsel %vm3075, %v2947, %v3203
  %v3332 = vsel %vm3076, %v2948, %v3204
  %v3333 = vsel %vm3077, %v2949, %v3205
  %v3334 = vsel %vm3078, %v2950, %v3206
  %v3335 = vsel %vm3079, %v2951, %v3207
  %v3336 = vsel %vm3080, %v2952, %v3208
  %v3337 = vsel %vm3081, %v2953, %v3209
  %v3338 = vsel %vm3082, %v2954, %v3210
  %v3339 = vsel %vm3083, %v2955, %v3211
  %v3340 = vsel %vm3084, %v2956, %v3212
  %v3341 = vsel %vm3085, %v2957, %v3213
  %v3342 = vsel %vm3086, %v2958, %v3214
  %v3343 = vsel %vm3087, %v2959, %v3215
  %v3344 = vsel %vm3088, %v2960, %v3216
  %v3345 = vsel %vm3089, %v2961, %v3217
  %v3346 = vsel %vm3090, %v2962, %v3218
  %v3347 = vsel %vm3091, %v2963, %v3219
  %v3348 = vsel %vm3092, %v2964, %v3220
  %v3349 = vsel %vm3093, %v2965, %v3221
  %v3350 = vsel %vm3094, %v2966, %v3222
  %v3351 = vsel %vm3095, %v2967, %v3223
  %v3352 = vsel %vm3096, %v2968, %v3224
  %v3353 = vsel %vm3097, %v2969, %v3225
  %v3354 = vsel %vm3098, %v2970, %v3226
  %v3355 = vsel %vm3099, %v2971, %v3227
  %v3356 = vsel %vm3100, %v2972, %v3228
  %v3357 = vsel %vm3101, %v2973, %v3229
  %v3358 = vsel %vm3102, %v2974, %v3230
  %v3359 = vsel %vm3103, %v2975, %v3231
  %v3360 = vsel %vm3104, %v2976, %v3232
  %v3361 = vsel %vm3105, %v2977, %v3233
  %v3362 = vsel %vm3106, %v2978, %v3234
  %v3363 = vsel %vm3107, %v2979, %v3235
  %v3364 = vsel %vm3108, %v2980, %v3236
  %v3365 = vsel %vm3109, %v2981, %v3237
  %v3366 = vsel %vm3110, %v2982, %v3238
  %v3367 = vsel %vm3111, %v2983, %v3239
  %v3368 = vsel %vm3112, %v2984, %v3240
  %v3369 = vsel %vm3113, %v2985, %v3241
  %v3370 = vsel %vm3114, %v2986, %v3242
  %v3371 = vsel %vm3115, %v2987, %v3243
  %v3372 = vsel %vm3116, %v2988, %v3244
  %v3373 = vsel %vm3117, %v2989, %v3245
  %v3374 = vsel %vm3118, %v2990, %v3246
  %v3375 = vsel %vm3119, %v2991, %v3247
  %v3376 = vsel %vm3120, %v2992, %v3248
  %v3377 = vsel %vm3121, %v2993, %v3249
  %v3378 = vsel %vm3122, %v2994, %v3250
  %v3379 = vsel %vm3123, %v2995, %v3251
  %v3380 = vsel %vm3124, %v2996, %v3252
  %v3381 = vsel %vm3125, %v2997, %v3253
  %v3382 = vsel %vm3126, %v2998, %v3254
  %v3383 = vsel %vm3127, %v2999, %v3255
  %v3384 = vsel %vm3128, %v3000, %v3256
  %v3385 = vsel %vm3129, %v3001, %v3257
  %v3386 = vsel %vm3130, %v3002, %v3258
  %v3387 = vsel %vm3131, %v3003, %v3259
  %v3388 = vsel %vm3132, %v3004, %v3260
  %v3389 = vsel %vm3133, %v3005, %v3261
  %v3390 = vsel %vm3134, %v3006, %v3262
  %v3391 = vsel %vm3135, %v3007, %v3263
  %v3392 = vsel %vm3136, %v3008, %v3264
  %v3393 = vsel %vm3137, %v3009, %v3265
  %v3394 = vsel %vm3138, %v3010, %v3266
  %v3395 = vsel %vm3139, %v3011, %v3267
  %v3396 = vsel %vm3140, %v3012, %v3268
  %v3397 = vsel %vm3141, %v3013, %v3269
  %v3398 = vsel %vm3142, %v3014, %v3270
  %v3399 = vsel %vm3143, %v3015, %v3271
  %v3400 = vsel %vm3144, %v3016, %v3272
  %v3401 = vsel %vm3145, %v3017, %v3273
  %v3402 = vsel %vm3146, %v3018, %v3274
  %v3403 = vsel %vm3147, %v3019, %v3275
  %v3404 = vsel %vm3148, %v3020, %v3276
  %v3405 = vsel %vm3149, %v3021, %v3277
  %v3406 = vsel %vm3150, %v3022, %v3278
  %v3407 = vsel %vm3151, %v3023, %v3279
  %v3408 = vsel %vm3152, %v3024, %v3280
  %v3409 = vsel %vm3153, %v3025, %v3281
  %v3410 = vsel %vm3154, %v3026, %v3282
  %v3411 = vsel %vm3155, %v3027, %v3283
  %v3412 = vsel %vm3156, %v3028, %v3284
  %v3413 = vsel %vm3157, %v3029, %v3285
  %v3414 = vsel %vm3158, %v3030, %v3286
  %v3415 = vsel %vm3159, %v3031, %v3287
  %v3416 = vsel %vm3160, %v3032, %v3288
  %v3417 = vsel %vm3161, %v3033, %v3289
  %v3418 = vsel %vm3162, %v3034, %v3290
  %v3419 = vsel %vm3163, %v3035, %v3291
  %v3420 = vsel %vm3164, %v3036, %v3292
  %v3421 = vsel %vm3165, %v3037, %v3293
  %v3422 = vsel %vm3166, %v3038, %v3294
  %v3423 = vsel %vm3167, %v3039, %v3295
  %v3424 = vsel %vm3168, %v3040, %v3296
  %v3425 = vsel %vm3169, %v3041, %v3297
  %v3426 = vsel %vm3170, %v3042, %v3298
  %v3427 = vsel %vm3171, %v3043, %v3299
  %v3428 = vsel %vm3172, %v3044, %v3300
  %v3429 = vsel %vm3173, %v3045, %v3301
  %v3430 = vsel %vm3174, %v3046, %v3302
  %v3431 = vsel %vm3175, %v3047, %v3303
  %v3432 = vsel %vm3176, %v3048, %v3304
  %v3433 = vsel %vm3177, %v3049, %v3305
  %v3434 = vsel %vm3178, %v3050, %v3306
  %v3435 = vsel %vm3179, %v3051, %v3307
  %v3436 = vsel %vm3180, %v3052, %v3308
  %v3437 = vsel %vm3181, %v3053, %v3309
  %v3438 = vsel %vm3182, %v3054, %v3310
  %v3439 = vsel %vm3183, %v3055, %v3311
  %v3440 = vsel %vm3184, %v3056, %v3312
  %v3441 = vsel %vm3185, %v3057, %v3313
  %v3442 = vsel %vm3186, %v3058, %v3314
  %v3443 = vsel %vm3187, %v3059, %v3315
  %v3444 = vsel %vm3188, %v3060, %v3316
  %v3445 = vld [vmem:[%s9] sm:$0xff]
  %v3446 = vld [vmem:[%s9 + $0x8] sm:$0xff]
  %v3447 = vld [vmem:[%s9 + $0x10] sm:$0xff]
  %v3448 = vld [vmem:[%s9 + $0x18] sm:$0xff]
  %v3449 = vld [vmem:[%s9 + $0x20] sm:$0xff]
  %v3450 = vld [vmem:[%s9 + $0x28] sm:$0xff]
  %v3451 = vld [vmem:[%s9 + $0x30] sm:$0xff]
  %v3452 = vld [vmem:[%s9 + $0x38] sm:$0xff]
  %v3453 = vld [vmem:[%s9 + $0x40] sm:$0xff]
  %v3454 = vld [vmem:[%s9 + $0x48] sm:$0xff]
  %v3455 = vld [vmem:[%s9 + $0x50] sm:$0xff]
  %v3456 = vld [vmem:[%s9 + $0x58] sm:$0xff]
  %v3457 = vld [vmem:[%s9 + $0x60] sm:$0xff]
  %v3458 = vld [vmem:[%s9 + $0x68] sm:$0xff]
  %v3459 = vld [vmem:[%s9 + $0x70] sm:$0xff]
  %v3460 = vld [vmem:[%s9 + $0x78] sm:$0xff]
  %v3461 = vld [vmem:[%s9 + $0x80] sm:$0xff]
  %v3462 = vld [vmem:[%s9 + $0x88] sm:$0xff]
  %v3463 = vld [vmem:[%s9 + $0x90] sm:$0xff]
  %v3464 = vld [vmem:[%s9 + $0x98] sm:$0xff]
  %v3465 = vld [vmem:[%s9 + $0xa0] sm:$0xff]
  %v3466 = vld [vmem:[%s9 + $0xa8] sm:$0xff]
  %v3467 = vld [vmem:[%s9 + $0xb0] sm:$0xff]
  %v3468 = vld [vmem:[%s9 + $0xb8] sm:$0xff]
  %v3469 = vld [vmem:[%s9 + $0xc0] sm:$0xff]
  %v3470 = vld [vmem:[%s9 + $0xc8] sm:$0xff]
  %v3471 = vld [vmem:[%s9 + $0xd0] sm:$0xff]
  %v3472 = vld [vmem:[%s9 + $0xd8] sm:$0xff]
  %v3473 = vld [vmem:[%s9 + $0xe0] sm:$0xff]
  %v3474 = vld [vmem:[%s9 + $0xe8] sm:$0xff]
  %v3475 = vld [vmem:[%s9 + $0xf0] sm:$0xff]
  %v3476 = vld [vmem:[%s9 + $0xf8] sm:$0xff]
  %v3477 = vld [vmem:[%s9 + $0x100] sm:$0xff]
  %v3478 = vld [vmem:[%s9 + $0x108] sm:$0xff]
  %v3479 = vld [vmem:[%s9 + $0x110] sm:$0xff]
  %v3480 = vld [vmem:[%s9 + $0x118] sm:$0xff]
  %v3481 = vld [vmem:[%s9 + $0x120] sm:$0xff]
  %v3482 = vld [vmem:[%s9 + $0x128] sm:$0xff]
  %v3483 = vld [vmem:[%s9 + $0x130] sm:$0xff]
  %v3484 = vld [vmem:[%s9 + $0x138] sm:$0xff]
  %v3485 = vld [vmem:[%s9 + $0x140] sm:$0xff]
  %v3486 = vld [vmem:[%s9 + $0x148] sm:$0xff]
  %v3487 = vld [vmem:[%s9 + $0x150] sm:$0xff]
  %v3488 = vld [vmem:[%s9 + $0x158] sm:$0xff]
  %v3489 = vld [vmem:[%s9 + $0x160] sm:$0xff]
  %v3490 = vld [vmem:[%s9 + $0x168] sm:$0xff]
  %v3491 = vld [vmem:[%s9 + $0x170] sm:$0xff]
  %v3492 = vld [vmem:[%s9 + $0x178] sm:$0xff]
  %v3493 = vld [vmem:[%s9 + $0x180] sm:$0xff]
  %v3494 = vld [vmem:[%s9 + $0x188] sm:$0xff]
  %v3495 = vld [vmem:[%s9 + $0x190] sm:$0xff]
  %v3496 = vld [vmem:[%s9 + $0x198] sm:$0xff]
  %v3497 = vld [vmem:[%s9 + $0x1a0] sm:$0xff]
  %v3498 = vld [vmem:[%s9 + $0x1a8] sm:$0xff]
  %v3499 = vld [vmem:[%s9 + $0x1b0] sm:$0xff]
  %v3500 = vld [vmem:[%s9 + $0x1b8] sm:$0xff]
  %v3501 = vld [vmem:[%s9 + $0x1c0] sm:$0xff]
  %v3502 = vld [vmem:[%s9 + $0x1c8] sm:$0xff]
  %v3503 = vld [vmem:[%s9 + $0x1d0] sm:$0xff]
  %v3504 = vld [vmem:[%s9 + $0x1d8] sm:$0xff]
  %v3505 = vld [vmem:[%s9 + $0x1e0] sm:$0xff]
  %v3506 = vld [vmem:[%s9 + $0x1e8] sm:$0xff]
  %v3507 = vld [vmem:[%s9 + $0x1f0] sm:$0xff]
  %v3508 = vld [vmem:[%s9 + $0x1f8] sm:$0xff]
  %v3509 = vld [vmem:[%s9 + $0x200] sm:$0xff]
  %v3510 = vld [vmem:[%s9 + $0x208] sm:$0xff]
  %v3511 = vld [vmem:[%s9 + $0x210] sm:$0xff]
  %v3512 = vld [vmem:[%s9 + $0x218] sm:$0xff]
  %v3513 = vld [vmem:[%s9 + $0x220] sm:$0xff]
  %v3514 = vld [vmem:[%s9 + $0x228] sm:$0xff]
  %v3515 = vld [vmem:[%s9 + $0x230] sm:$0xff]
  %v3516 = vld [vmem:[%s9 + $0x238] sm:$0xff]
  %v3517 = vld [vmem:[%s9 + $0x240] sm:$0xff]
  %v3518 = vld [vmem:[%s9 + $0x248] sm:$0xff]
  %v3519 = vld [vmem:[%s9 + $0x250] sm:$0xff]
  %v3520 = vld [vmem:[%s9 + $0x258] sm:$0xff]
  %v3521 = vld [vmem:[%s9 + $0x260] sm:$0xff]
  %v3522 = vld [vmem:[%s9 + $0x268] sm:$0xff]
  %v3523 = vld [vmem:[%s9 + $0x270] sm:$0xff]
  %v3524 = vld [vmem:[%s9 + $0x278] sm:$0xff]
  %v3525 = vld [vmem:[%s9 + $0x280] sm:$0xff]
  %v3526 = vld [vmem:[%s9 + $0x288] sm:$0xff]
  %v3527 = vld [vmem:[%s9 + $0x290] sm:$0xff]
  %v3528 = vld [vmem:[%s9 + $0x298] sm:$0xff]
  %v3529 = vld [vmem:[%s9 + $0x2a0] sm:$0xff]
  %v3530 = vld [vmem:[%s9 + $0x2a8] sm:$0xff]
  %v3531 = vld [vmem:[%s9 + $0x2b0] sm:$0xff]
  %v3532 = vld [vmem:[%s9 + $0x2b8] sm:$0xff]
  %v3533 = vld [vmem:[%s9 + $0x2c0] sm:$0xff]
  %v3534 = vld [vmem:[%s9 + $0x2c8] sm:$0xff]
  %v3535 = vld [vmem:[%s9 + $0x2d0] sm:$0xff]
  %v3536 = vld [vmem:[%s9 + $0x2d8] sm:$0xff]
  %v3537 = vld [vmem:[%s9 + $0x2e0] sm:$0xff]
  %v3538 = vld [vmem:[%s9 + $0x2e8] sm:$0xff]
  %v3539 = vld [vmem:[%s9 + $0x2f0] sm:$0xff]
  %v3540 = vld [vmem:[%s9 + $0x2f8] sm:$0xff]
  %v3541 = vld [vmem:[%s9 + $0x300] sm:$0xff]
  %v3542 = vld [vmem:[%s9 + $0x308] sm:$0xff]
  %v3543 = vld [vmem:[%s9 + $0x310] sm:$0xff]
  %v3544 = vld [vmem:[%s9 + $0x318] sm:$0xff]
  %v3545 = vld [vmem:[%s9 + $0x320] sm:$0xff]
  %v3546 = vld [vmem:[%s9 + $0x328] sm:$0xff]
  %v3547 = vld [vmem:[%s9 + $0x330] sm:$0xff]
  %v3548 = vld [vmem:[%s9 + $0x338] sm:$0xff]
  %v3549 = vld [vmem:[%s9 + $0x340] sm:$0xff]
  %v3550 = vld [vmem:[%s9 + $0x348] sm:$0xff]
  %v3551 = vld [vmem:[%s9 + $0x350] sm:$0xff]
  %v3552 = vld [vmem:[%s9 + $0x358] sm:$0xff]
  %v3553 = vld [vmem:[%s9 + $0x360] sm:$0xff]
  %v3554 = vld [vmem:[%s9 + $0x368] sm:$0xff]
  %v3555 = vld [vmem:[%s9 + $0x370] sm:$0xff]
  %v3556 = vld [vmem:[%s9 + $0x378] sm:$0xff]
  %v3557 = vld [vmem:[%s9 + $0x380] sm:$0xff]
  %v3558 = vld [vmem:[%s9 + $0x388] sm:$0xff]
  %v3559 = vld [vmem:[%s9 + $0x390] sm:$0xff]
  %v3560 = vld [vmem:[%s9 + $0x398] sm:$0xff]
  %v3561 = vld [vmem:[%s9 + $0x3a0] sm:$0xff]
  %v3562 = vld [vmem:[%s9 + $0x3a8] sm:$0xff]
  %v3563 = vld [vmem:[%s9 + $0x3b0] sm:$0xff]
  %v3564 = vld [vmem:[%s9 + $0x3b8] sm:$0xff]
  %v3565 = vld [vmem:[%s9 + $0x3c0] sm:$0xff]
  %v3566 = vld [vmem:[%s9 + $0x3c8] sm:$0xff]
  %v3567 = vld [vmem:[%s9 + $0x3d0] sm:$0xff]
  %v3568 = vld [vmem:[%s9 + $0x3d8] sm:$0xff]
  %v3569 = vld [vmem:[%s9 + $0x3e0] sm:$0xff]
  %v3570 = vld [vmem:[%s9 + $0x3e8] sm:$0xff]
  %v3571 = vld [vmem:[%s9 + $0x3f0] sm:$0xff]
  %v3572 = vld [vmem:[%s9 + $0x3f8] sm:$0xff]
  %v3573 = vunpack.c.l.s8.bf16 %v3445
  %v3574 = vunpack.c.l.s8.bf16 %v3446
  %v3575 = vunpack.c.l.s8.bf16 %v3447
  %v3576 = vunpack.c.l.s8.bf16 %v3448
  %v3577 = vunpack.c.l.s8.bf16 %v3449
  %v3578 = vunpack.c.l.s8.bf16 %v3450
  %v3579 = vunpack.c.l.s8.bf16 %v3451
  %v3580 = vunpack.c.l.s8.bf16 %v3452
  %v3581 = vunpack.c.h.s8.bf16 %v3445
  %v3582 = vunpack.c.h.s8.bf16 %v3446
  %v3583 = vunpack.c.h.s8.bf16 %v3447
  %v3584 = vunpack.c.h.s8.bf16 %v3448
  %v3585 = vunpack.c.h.s8.bf16 %v3449
  %v3586 = vunpack.c.h.s8.bf16 %v3450
  %v3587 = vunpack.c.h.s8.bf16 %v3451
  %v3588 = vunpack.c.h.s8.bf16 %v3452
  %v3589 = vunpack.c.l.s8.bf16 %v3453
  %v3590 = vunpack.c.l.s8.bf16 %v3454
  %v3591 = vunpack.c.l.s8.bf16 %v3455
  %v3592 = vunpack.c.l.s8.bf16 %v3456
  %v3593 = vunpack.c.l.s8.bf16 %v3457
  %v3594 = vunpack.c.l.s8.bf16 %v3458
  %v3595 = vunpack.c.l.s8.bf16 %v3459
  %v3596 = vunpack.c.l.s8.bf16 %v3460
  %v3597 = vunpack.c.h.s8.bf16 %v3453
  %v3598 = vunpack.c.h.s8.bf16 %v3454
  %v3599 = vunpack.c.h.s8.bf16 %v3455
  %v3600 = vunpack.c.h.s8.bf16 %v3456
  %v3601 = vunpack.c.h.s8.bf16 %v3457
  %v3602 = vunpack.c.h.s8.bf16 %v3458
  %v3603 = vunpack.c.h.s8.bf16 %v3459
  %v3604 = vunpack.c.h.s8.bf16 %v3460
  %v3605 = vunpack.c.l.s8.bf16 %v3461
  %v3606 = vunpack.c.l.s8.bf16 %v3462
  %v3607 = vunpack.c.l.s8.bf16 %v3463
  %v3608 = vunpack.c.l.s8.bf16 %v3464
  %v3609 = vunpack.c.l.s8.bf16 %v3465
  %v3610 = vunpack.c.l.s8.bf16 %v3466
  %v3611 = vunpack.c.l.s8.bf16 %v3467
  %v3612 = vunpack.c.l.s8.bf16 %v3468
  %v3613 = vunpack.c.h.s8.bf16 %v3461
  %v3614 = vunpack.c.h.s8.bf16 %v3462
  %v3615 = vunpack.c.h.s8.bf16 %v3463
  %v3616 = vunpack.c.h.s8.bf16 %v3464
  %v3617 = vunpack.c.h.s8.bf16 %v3465
  %v3618 = vunpack.c.h.s8.bf16 %v3466
  %v3619 = vunpack.c.h.s8.bf16 %v3467
  %v3620 = vunpack.c.h.s8.bf16 %v3468
  %v3621 = vunpack.c.l.s8.bf16 %v3469
  %v3622 = vunpack.c.l.s8.bf16 %v3470
  %v3623 = vunpack.c.l.s8.bf16 %v3471
  %v3624 = vunpack.c.l.s8.bf16 %v3472
  %v3625 = vunpack.c.l.s8.bf16 %v3473
  %v3626 = vunpack.c.l.s8.bf16 %v3474
  %v3627 = vunpack.c.l.s8.bf16 %v3475
  %v3628 = vunpack.c.l.s8.bf16 %v3476
  %v3629 = vunpack.c.h.s8.bf16 %v3469
  %v3630 = vunpack.c.h.s8.bf16 %v3470
  %v3631 = vunpack.c.h.s8.bf16 %v3471
  %v3632 = vunpack.c.h.s8.bf16 %v3472
  %v3633 = vunpack.c.h.s8.bf16 %v3473
  %v3634 = vunpack.c.h.s8.bf16 %v3474
  %v3635 = vunpack.c.h.s8.bf16 %v3475
  %v3636 = vunpack.c.h.s8.bf16 %v3476
  %v3637 = vunpack.c.l.s8.bf16 %v3477
  %v3638 = vunpack.c.l.s8.bf16 %v3478
  %v3639 = vunpack.c.l.s8.bf16 %v3479
  %v3640 = vunpack.c.l.s8.bf16 %v3480
  %v3641 = vunpack.c.l.s8.bf16 %v3481
  %v3642 = vunpack.c.l.s8.bf16 %v3482
  %v3643 = vunpack.c.l.s8.bf16 %v3483
  %v3644 = vunpack.c.l.s8.bf16 %v3484
  %v3645 = vunpack.c.h.s8.bf16 %v3477
  %v3646 = vunpack.c.h.s8.bf16 %v3478
  %v3647 = vunpack.c.h.s8.bf16 %v3479
  %v3648 = vunpack.c.h.s8.bf16 %v3480
  %v3649 = vunpack.c.h.s8.bf16 %v3481
  %v3650 = vunpack.c.h.s8.bf16 %v3482
  %v3651 = vunpack.c.h.s8.bf16 %v3483
  %v3652 = vunpack.c.h.s8.bf16 %v3484
  %v3653 = vunpack.c.l.s8.bf16 %v3485
  %v3654 = vunpack.c.l.s8.bf16 %v3486
  %v3655 = vunpack.c.l.s8.bf16 %v3487
  %v3656 = vunpack.c.l.s8.bf16 %v3488
  %v3657 = vunpack.c.l.s8.bf16 %v3489
  %v3658 = vunpack.c.l.s8.bf16 %v3490
  %v3659 = vunpack.c.l.s8.bf16 %v3491
  %v3660 = vunpack.c.l.s8.bf16 %v3492
  %v3661 = vunpack.c.h.s8.bf16 %v3485
  %v3662 = vunpack.c.h.s8.bf16 %v3486
  %v3663 = vunpack.c.h.s8.bf16 %v3487
  %v3664 = vunpack.c.h.s8.bf16 %v3488
  %v3665 = vunpack.c.h.s8.bf16 %v3489
  %v3666 = vunpack.c.h.s8.bf16 %v3490
  %v3667 = vunpack.c.h.s8.bf16 %v3491
  %v3668 = vunpack.c.h.s8.bf16 %v3492
  %v3669 = vunpack.c.l.s8.bf16 %v3493
  %v3670 = vunpack.c.l.s8.bf16 %v3494
  %v3671 = vunpack.c.l.s8.bf16 %v3495
  %v3672 = vunpack.c.l.s8.bf16 %v3496
  %v3673 = vunpack.c.l.s8.bf16 %v3497
  %v3674 = vunpack.c.l.s8.bf16 %v3498
  %v3675 = vunpack.c.l.s8.bf16 %v3499
  %v3676 = vunpack.c.l.s8.bf16 %v3500
  %v3677 = vunpack.c.h.s8.bf16 %v3493
  %v3678 = vunpack.c.h.s8.bf16 %v3494
  %v3679 = vunpack.c.h.s8.bf16 %v3495
  %v3680 = vunpack.c.h.s8.bf16 %v3496
  %v3681 = vunpack.c.h.s8.bf16 %v3497
  %v3682 = vunpack.c.h.s8.bf16 %v3498
  %v3683 = vunpack.c.h.s8.bf16 %v3499
  %v3684 = vunpack.c.h.s8.bf16 %v3500
  %v3685 = vunpack.c.l.s8.bf16 %v3501
  %v3686 = vunpack.c.l.s8.bf16 %v3502
  %v3687 = vunpack.c.l.s8.bf16 %v3503
  %v3688 = vunpack.c.l.s8.bf16 %v3504
  %v3689 = vunpack.c.l.s8.bf16 %v3505
  %v3690 = vunpack.c.l.s8.bf16 %v3506
  %v3691 = vunpack.c.l.s8.bf16 %v3507
  %v3692 = vunpack.c.l.s8.bf16 %v3508
  %v3693 = vunpack.c.h.s8.bf16 %v3501
  %v3694 = vunpack.c.h.s8.bf16 %v3502
  %v3695 = vunpack.c.h.s8.bf16 %v3503
  %v3696 = vunpack.c.h.s8.bf16 %v3504
  %v3697 = vunpack.c.h.s8.bf16 %v3505
  %v3698 = vunpack.c.h.s8.bf16 %v3506
  %v3699 = vunpack.c.h.s8.bf16 %v3507
  %v3700 = vunpack.c.h.s8.bf16 %v3508
  %v3701 = vunpack.c.l.s8.bf16 %v3509
  %v3702 = vunpack.c.l.s8.bf16 %v3510
  %v3703 = vunpack.c.l.s8.bf16 %v3511
  %v3704 = vunpack.c.l.s8.bf16 %v3512
  %v3705 = vunpack.c.l.s8.bf16 %v3513
  %v3706 = vunpack.c.l.s8.bf16 %v3514
  %v3707 = vunpack.c.l.s8.bf16 %v3515
  %v3708 = vunpack.c.l.s8.bf16 %v3516
  %v3709 = vunpack.c.h.s8.bf16 %v3509
  %v3710 = vunpack.c.h.s8.bf16 %v3510
  %v3711 = vunpack.c.h.s8.bf16 %v3511
  %v3712 = vunpack.c.h.s8.bf16 %v3512
  %v3713 = vunpack.c.h.s8.bf16 %v3513
  %v3714 = vunpack.c.h.s8.bf16 %v3514
  %v3715 = vunpack.c.h.s8.bf16 %v3515
  %v3716 = vunpack.c.h.s8.bf16 %v3516
  %v3717 = vunpack.c.l.s8.bf16 %v3517
  %v3718 = vunpack.c.l.s8.bf16 %v3518
  %v3719 = vunpack.c.l.s8.bf16 %v3519
  %v3720 = vunpack.c.l.s8.bf16 %v3520
  %v3721 = vunpack.c.l.s8.bf16 %v3521
  %v3722 = vunpack.c.l.s8.bf16 %v3522
  %v3723 = vunpack.c.l.s8.bf16 %v3523
  %v3724 = vunpack.c.l.s8.bf16 %v3524
  %v3725 = vunpack.c.h.s8.bf16 %v3517
  %v3726 = vunpack.c.h.s8.bf16 %v3518
  %v3727 = vunpack.c.h.s8.bf16 %v3519
  %v3728 = vunpack.c.h.s8.bf16 %v3520
  %v3729 = vunpack.c.h.s8.bf16 %v3521
  %v3730 = vunpack.c.h.s8.bf16 %v3522
  %v3731 = vunpack.c.h.s8.bf16 %v3523
  %v3732 = vunpack.c.h.s8.bf16 %v3524
  %v3733 = vunpack.c.l.s8.bf16 %v3525
  %v3734 = vunpack.c.l.s8.bf16 %v3526
  %v3735 = vunpack.c.l.s8.bf16 %v3527
  %v3736 = vunpack.c.l.s8.bf16 %v3528
  %v3737 = vunpack.c.l.s8.bf16 %v3529
  %v3738 = vunpack.c.l.s8.bf16 %v3530
  %v3739 = vunpack.c.l.s8.bf16 %v3531
  %v3740 = vunpack.c.l.s8.bf16 %v3532
  %v3741 = vunpack.c.h.s8.bf16 %v3525
  %v3742 = vunpack.c.h.s8.bf16 %v3526
  %v3743 = vunpack.c.h.s8.bf16 %v3527
  %v3744 = vunpack.c.h.s8.bf16 %v3528
  %v3745 = vunpack.c.h.s8.bf16 %v3529
  %v3746 = vunpack.c.h.s8.bf16 %v3530
  %v3747 = vunpack.c.h.s8.bf16 %v3531
  %v3748 = vunpack.c.h.s8.bf16 %v3532
  %v3749 = vunpack.c.l.s8.bf16 %v3533
  %v3750 = vunpack.c.l.s8.bf16 %v3534
  %v3751 = vunpack.c.l.s8.bf16 %v3535
  %v3752 = vunpack.c.l.s8.bf16 %v3536
  %v3753 = vunpack.c.l.s8.bf16 %v3537
  %v3754 = vunpack.c.l.s8.bf16 %v3538
  %v3755 = vunpack.c.l.s8.bf16 %v3539
  %v3756 = vunpack.c.l.s8.bf16 %v3540
  %v3757 = vunpack.c.h.s8.bf16 %v3533
  %v3758 = vunpack.c.h.s8.bf16 %v3534
  %v3759 = vunpack.c.h.s8.bf16 %v3535
  %v3760 = vunpack.c.h.s8.bf16 %v3536
  %v3761 = vunpack.c.h.s8.bf16 %v3537
  %v3762 = vunpack.c.h.s8.bf16 %v3538
  %v3763 = vunpack.c.h.s8.bf16 %v3539
  %v3764 = vunpack.c.h.s8.bf16 %v3540
  %v3765 = vunpack.c.l.s8.bf16 %v3541
  %v3766 = vunpack.c.l.s8.bf16 %v3542
  %v3767 = vunpack.c.l.s8.bf16 %v3543
  %v3768 = vunpack.c.l.s8.bf16 %v3544
  %v3769 = vunpack.c.l.s8.bf16 %v3545
  %v3770 = vunpack.c.l.s8.bf16 %v3546
  %v3771 = vunpack.c.l.s8.bf16 %v3547
  %v3772 = vunpack.c.l.s8.bf16 %v3548
  %v3773 = vunpack.c.h.s8.bf16 %v3541
  %v3774 = vunpack.c.h.s8.bf16 %v3542
  %v3775 = vunpack.c.h.s8.bf16 %v3543
  %v3776 = vunpack.c.h.s8.bf16 %v3544
  %v3777 = vunpack.c.h.s8.bf16 %v3545
  %v3778 = vunpack.c.h.s8.bf16 %v3546
  %v3779 = vunpack.c.h.s8.bf16 %v3547
  %v3780 = vunpack.c.h.s8.bf16 %v3548
  %v3781 = vunpack.c.l.s8.bf16 %v3549
  %v3782 = vunpack.c.l.s8.bf16 %v3550
  %v3783 = vunpack.c.l.s8.bf16 %v3551
  %v3784 = vunpack.c.l.s8.bf16 %v3552
  %v3785 = vunpack.c.l.s8.bf16 %v3553
  %v3786 = vunpack.c.l.s8.bf16 %v3554
  %v3787 = vunpack.c.l.s8.bf16 %v3555
  %v3788 = vunpack.c.l.s8.bf16 %v3556
  %v3789 = vunpack.c.h.s8.bf16 %v3549
  %v3790 = vunpack.c.h.s8.bf16 %v3550
  %v3791 = vunpack.c.h.s8.bf16 %v3551
  %v3792 = vunpack.c.h.s8.bf16 %v3552
  %v3793 = vunpack.c.h.s8.bf16 %v3553
  %v3794 = vunpack.c.h.s8.bf16 %v3554
  %v3795 = vunpack.c.h.s8.bf16 %v3555
  %v3796 = vunpack.c.h.s8.bf16 %v3556
  %v3797 = vunpack.c.l.s8.bf16 %v3557
  %v3798 = vunpack.c.l.s8.bf16 %v3558
  %v3799 = vunpack.c.l.s8.bf16 %v3559
  %v3800 = vunpack.c.l.s8.bf16 %v3560
  %v3801 = vunpack.c.l.s8.bf16 %v3561
  %v3802 = vunpack.c.l.s8.bf16 %v3562
  %v3803 = vunpack.c.l.s8.bf16 %v3563
  %v3804 = vunpack.c.l.s8.bf16 %v3564
  %v3805 = vunpack.c.h.s8.bf16 %v3557
  %v3806 = vunpack.c.h.s8.bf16 %v3558
  %v3807 = vunpack.c.h.s8.bf16 %v3559
  %v3808 = vunpack.c.h.s8.bf16 %v3560
  %v3809 = vunpack.c.h.s8.bf16 %v3561
  %v3810 = vunpack.c.h.s8.bf16 %v3562
  %v3811 = vunpack.c.h.s8.bf16 %v3563
  %v3812 = vunpack.c.h.s8.bf16 %v3564
  %v3813 = vunpack.c.l.s8.bf16 %v3565
  %v3814 = vunpack.c.l.s8.bf16 %v3566
  %v3815 = vunpack.c.l.s8.bf16 %v3567
  %v3816 = vunpack.c.l.s8.bf16 %v3568
  %v3817 = vunpack.c.l.s8.bf16 %v3569
  %v3818 = vunpack.c.l.s8.bf16 %v3570
  %v3819 = vunpack.c.l.s8.bf16 %v3571
  %v3820 = vunpack.c.l.s8.bf16 %v3572
  %v3821 = vunpack.c.h.s8.bf16 %v3565
  %v3822 = vunpack.c.h.s8.bf16 %v3566
  %v3823 = vunpack.c.h.s8.bf16 %v3567
  %v3824 = vunpack.c.h.s8.bf16 %v3568
  %v3825 = vunpack.c.h.s8.bf16 %v3569
  %v3826 = vunpack.c.h.s8.bf16 %v3570
  %v3827 = vunpack.c.h.s8.bf16 %v3571
  %v3828 = vunpack.c.h.s8.bf16 %v3572
  %v3829 = vpack.c.bf16 %v3321, %v3317
  %v3830 = vpack.c.bf16 %v3322, %v3318
  %v3831 = vpack.c.bf16 %v3323, %v3319
  %v3832 = vpack.c.bf16 %v3324, %v3320
  %v3833 = vpack.c.bf16 %v3329, %v3325
  %v3834 = vpack.c.bf16 %v3330, %v3326
  %v3835 = vpack.c.bf16 %v3331, %v3327
  %v3836 = vpack.c.bf16 %v3332, %v3328
  %v3837 = vpack.c.bf16 %v3337, %v3333
  %v3838 = vpack.c.bf16 %v3338, %v3334
  %v3839 = vpack.c.bf16 %v3339, %v3335
  %v3840 = vpack.c.bf16 %v3340, %v3336
  %v3841 = vpack.c.bf16 %v3345, %v3341
  %v3842 = vpack.c.bf16 %v3346, %v3342
  %v3843 = vpack.c.bf16 %v3347, %v3343
  %v3844 = vpack.c.bf16 %v3348, %v3344
  %v3845 = vpack.c.bf16 %v3353, %v3349
  %v3846 = vpack.c.bf16 %v3354, %v3350
  %v3847 = vpack.c.bf16 %v3355, %v3351
  %v3848 = vpack.c.bf16 %v3356, %v3352
  %v3849 = vpack.c.bf16 %v3361, %v3357
  %v3850 = vpack.c.bf16 %v3362, %v3358
  %v3851 = vpack.c.bf16 %v3363, %v3359
  %v3852 = vpack.c.bf16 %v3364, %v3360
  %v3853 = vpack.c.bf16 %v3369, %v3365
  %v3854 = vpack.c.bf16 %v3370, %v3366
  %v3855 = vpack.c.bf16 %v3371, %v3367
  %v3856 = vpack.c.bf16 %v3372, %v3368
  %v3857 = vpack.c.bf16 %v3377, %v3373
  %v3858 = vpack.c.bf16 %v3378, %v3374
  %v3859 = vpack.c.bf16 %v3379, %v3375
  %v3860 = vpack.c.bf16 %v3380, %v3376
  %v3861 = vpack.c.bf16 %v3385, %v3381
  %v3862 = vpack.c.bf16 %v3386, %v3382
  %v3863 = vpack.c.bf16 %v3387, %v3383
  %v3864 = vpack.c.bf16 %v3388, %v3384
  %v3865 = vpack.c.bf16 %v3393, %v3389
  %v3866 = vpack.c.bf16 %v3394, %v3390
  %v3867 = vpack.c.bf16 %v3395, %v3391
  %v3868 = vpack.c.bf16 %v3396, %v3392
  %v3869 = vpack.c.bf16 %v3401, %v3397
  %v3870 = vpack.c.bf16 %v3402, %v3398
  %v3871 = vpack.c.bf16 %v3403, %v3399
  %v3872 = vpack.c.bf16 %v3404, %v3400
  %v3873 = vpack.c.bf16 %v3409, %v3405
  %v3874 = vpack.c.bf16 %v3410, %v3406
  %v3875 = vpack.c.bf16 %v3411, %v3407
  %v3876 = vpack.c.bf16 %v3412, %v3408
  %v3877 = vpack.c.bf16 %v3417, %v3413
  %v3878 = vpack.c.bf16 %v3418, %v3414
  %v3879 = vpack.c.bf16 %v3419, %v3415
  %v3880 = vpack.c.bf16 %v3420, %v3416
  %v3881 = vpack.c.bf16 %v3425, %v3421
  %v3882 = vpack.c.bf16 %v3426, %v3422
  %v3883 = vpack.c.bf16 %v3427, %v3423
  %v3884 = vpack.c.bf16 %v3428, %v3424
  %v3885 = vpack.c.bf16 %v3433, %v3429
  %v3886 = vpack.c.bf16 %v3434, %v3430
  %v3887 = vpack.c.bf16 %v3435, %v3431
  %v3888 = vpack.c.bf16 %v3436, %v3432
  %v3889 = vpack.c.bf16 %v3441, %v3437
  %v3890 = vpack.c.bf16 %v3442, %v3438
  %v3891 = vpack.c.bf16 %v3443, %v3439
  %v3892 = vpack.c.bf16 %v3444, %v3440
  %3893 = vmatprep.subr.bf16.mxu0 %v3630
  %3894 = vmatpush1.bf16.msra.mxu0 %v3629
  %3895 = vmatprep.subr.bf16.mxu0 %v3622
  %3896 = vmatpush1.bf16.msra.mxu0 %v3621
  %3897 = vmatprep.subr.bf16.mxu0 %v3614
  %3898 = vmatpush1.bf16.msra.mxu0 %v3613
  %3899 = vmatprep.subr.bf16.mxu0 %v3606
  %3900 = vmatpush1.bf16.msra.mxu0 %v3605
  %3901 = vmatprep.subr.bf16.mxu0 %v3598
  %3902 = vmatpush1.bf16.msra.mxu0 %v3597
  %3903 = vmatprep.subr.bf16.mxu0 %v3590
  %3904 = vmatpush1.bf16.msra.mxu0 %v3589
  %3905 = vmatprep.subr.bf16.mxu0 %v3582
  %3906 = vmatpush1.bf16.msra.mxu0 %v3581
  %3907 = vmatprep.subr.bf16.mxu0 %v3574
  %3908 = vmatpush1.bf16.msra.mxu0 %v3573
  %3909 = vmatprep.subr.bf16.mxu0 %v3694
  %3910 = vmatpush2.bf16.msra.mxu0 %v3693
  %3911 = vmatprep.subr.bf16.mxu0 %v3686
  %3912 = vmatpush2.bf16.msra.mxu0 %v3685
  %3913 = vmatprep.subr.bf16.mxu0 %v3678
  %3914 = vmatpush2.bf16.msra.mxu0 %v3677
  %3915 = vmatprep.subr.bf16.mxu0 %v3670
  %3916 = vmatpush2.bf16.msra.mxu0 %v3669
  %3917 = vmatprep.subr.bf16.mxu0 %v3662
  %3918 = vmatpush2.bf16.msra.mxu0 %v3661
  %3919 = vmatprep.subr.bf16.mxu0 %v3654
  %3920 = vmatpush2.bf16.msra.mxu0 %v3653
  %3921 = vmatprep.subr.bf16.mxu0 %v3646
  %3922 = vmatpush2.bf16.msra.mxu0 %v3645
  %3923 = vmatprep.subr.bf16.mxu0 %v3638
  %3924 = vmatpush2.bf16.msra.mxu0 %v3637
  %3925 = vmatprep.mubr.bf16.mxu0 %v3830
  %3926 = vmatmul.mubr.bf16.gmra.mxu0 %v3829
  %v3927 = vpop.f32.mrf.mxu0
  %v3928 = vadd.f32 0.0, %v3927
  %v3929 = vpop.f32.mrf.mxu0
  %v3930 = vadd.f32 0.0, %v3929
  %v3931 = vpop.f32.mrf.mxu0
  %v3932 = vadd.f32 0.0, %v3931
  %v3933 = vpop.f32.mrf.mxu0
  %v3934 = vadd.f32 0.0, %v3933
  %3935 = vmatprep.mubr.bf16.mxu0 %v3834
  %3936 = vmatmul.mubr.bf16.gmra.mxu0 %v3833
  %v3937 = vpop.f32.mrf.mxu0
  %v3938 = vadd.f32 0.0, %v3937
  %v3939 = vpop.f32.mrf.mxu0
  %v3940 = vadd.f32 0.0, %v3939
  %v3941 = vpop.f32.mrf.mxu0
  %v3942 = vadd.f32 0.0, %v3941
  %v3943 = vpop.f32.mrf.mxu0
  %v3944 = vadd.f32 0.0, %v3943
  %3945 = vmatprep.mubr.bf16.mxu0 %v3838
  %3946 = vmatmul.mubr.bf16.gmra.mxu0 %v3837
  %v3947 = vpop.f32.mrf.mxu0
  %v3948 = vadd.f32 0.0, %v3947
  %v3949 = vpop.f32.mrf.mxu0
  %v3950 = vadd.f32 0.0, %v3949
  %v3951 = vpop.f32.mrf.mxu0
  %v3952 = vadd.f32 0.0, %v3951
  %v3953 = vpop.f32.mrf.mxu0
  %v3954 = vadd.f32 0.0, %v3953
  %3955 = vmatprep.mubr.bf16.mxu0 %v3842
  %3956 = vmatmul.mubr.bf16.gmra.mxu0 %v3841
  %v3957 = vpop.f32.mrf.mxu0
  %v3958 = vadd.f32 0.0, %v3957
  %v3959 = vpop.f32.mrf.mxu0
  %v3960 = vadd.f32 0.0, %v3959
  %v3961 = vpop.f32.mrf.mxu0
  %v3962 = vadd.f32 0.0, %v3961
  %v3963 = vpop.f32.mrf.mxu0
  %v3964 = vadd.f32 0.0, %v3963
  %3965 = vmatprep.mubr.bf16.mxu0 %v3846
  %3966 = vmatmul.mubr.bf16.gmra.mxu0 %v3845
  %v3967 = vpop.f32.mrf.mxu0
  %v3968 = vadd.f32 0.0, %v3967
  %v3969 = vpop.f32.mrf.mxu0
  %v3970 = vadd.f32 0.0, %v3969
  %v3971 = vpop.f32.mrf.mxu0
  %v3972 = vadd.f32 0.0, %v3971
  %v3973 = vpop.f32.mrf.mxu0
  %v3974 = vadd.f32 0.0, %v3973
  %3975 = vmatprep.mubr.bf16.mxu0 %v3850
  %3976 = vmatmul.mubr.bf16.gmra.mxu0 %v3849
  %v3977 = vpop.f32.mrf.mxu0
  %v3978 = vadd.f32 0.0, %v3977
  %v3979 = vpop.f32.mrf.mxu0
  %v3980 = vadd.f32 0.0, %v3979
  %v3981 = vpop.f32.mrf.mxu0
  %v3982 = vadd.f32 0.0, %v3981
  %v3983 = vpop.f32.mrf.mxu0
  %v3984 = vadd.f32 0.0, %v3983
  %3985 = vmatprep.mubr.bf16.mxu0 %v3854
  %3986 = vmatmul.mubr.bf16.gmra.mxu0 %v3853
  %v3987 = vpop.f32.mrf.mxu0
  %v3988 = vadd.f32 0.0, %v3987
  %v3989 = vpop.f32.mrf.mxu0
  %v3990 = vadd.f32 0.0, %v3989
  %v3991 = vpop.f32.mrf.mxu0
  %v3992 = vadd.f32 0.0, %v3991
  %v3993 = vpop.f32.mrf.mxu0
  %v3994 = vadd.f32 0.0, %v3993
  %3995 = vmatprep.mubr.bf16.mxu0 %v3858
  %3996 = vmatmul.mubr.bf16.gmra.mxu0 %v3857
  %v3997 = vpop.f32.mrf.mxu0
  %v3998 = vadd.f32 0.0, %v3997
  %v3999 = vpop.f32.mrf.mxu0
  %v4000 = vadd.f32 0.0, %v3999
  %v4001 = vpop.f32.mrf.mxu0
  %v4002 = vadd.f32 0.0, %v4001
  %v4003 = vpop.f32.mrf.mxu0
  %v4004 = vadd.f32 0.0, %v4003
  %4005 = vmatprep.mubr.bf16.mxu0 %v3862
  %4006 = vmatmul.mubr.bf16.gmra.mxu0 %v3861
  %v4007 = vpop.f32.mrf.mxu0
  %v4008 = vadd.f32 0.0, %v4007
  %v4009 = vpop.f32.mrf.mxu0
  %v4010 = vadd.f32 0.0, %v4009
  %v4011 = vpop.f32.mrf.mxu0
  %v4012 = vadd.f32 0.0, %v4011
  %v4013 = vpop.f32.mrf.mxu0
  %v4014 = vadd.f32 0.0, %v4013
  %4015 = vmatprep.mubr.bf16.mxu0 %v3866
  %4016 = vmatmul.mubr.bf16.gmra.mxu0 %v3865
  %v4017 = vpop.f32.mrf.mxu0
  %v4018 = vadd.f32 0.0, %v4017
  %v4019 = vpop.f32.mrf.mxu0
  %v4020 = vadd.f32 0.0, %v4019
  %v4021 = vpop.f32.mrf.mxu0
  %v4022 = vadd.f32 0.0, %v4021
  %v4023 = vpop.f32.mrf.mxu0
  %v4024 = vadd.f32 0.0, %v4023
  %4025 = vmatprep.mubr.bf16.mxu0 %v3870
  %4026 = vmatmul.mubr.bf16.gmra.mxu0 %v3869
  %v4027 = vpop.f32.mrf.mxu0
  %v4028 = vadd.f32 0.0, %v4027
  %v4029 = vpop.f32.mrf.mxu0
  %v4030 = vadd.f32 0.0, %v4029
  %v4031 = vpop.f32.mrf.mxu0
  %v4032 = vadd.f32 0.0, %v4031
  %v4033 = vpop.f32.mrf.mxu0
  %v4034 = vadd.f32 0.0, %v4033
  %4035 = vmatprep.mubr.bf16.mxu0 %v3874
  %4036 = vmatmul.mubr.bf16.gmra.mxu0 %v3873
  %v4037 = vpop.f32.mrf.mxu0
  %v4038 = vadd.f32 0.0, %v4037
  %v4039 = vpop.f32.mrf.mxu0
  %v4040 = vadd.f32 0.0, %v4039
  %v4041 = vpop.f32.mrf.mxu0
  %v4042 = vadd.f32 0.0, %v4041
  %v4043 = vpop.f32.mrf.mxu0
  %v4044 = vadd.f32 0.0, %v4043
  %4045 = vmatprep.mubr.bf16.mxu0 %v3878
  %4046 = vmatmul.mubr.bf16.gmra.mxu0 %v3877
  %v4047 = vpop.f32.mrf.mxu0
  %v4048 = vadd.f32 0.0, %v4047
  %v4049 = vpop.f32.mrf.mxu0
  %v4050 = vadd.f32 0.0, %v4049
  %v4051 = vpop.f32.mrf.mxu0
  %v4052 = vadd.f32 0.0, %v4051
  %v4053 = vpop.f32.mrf.mxu0
  %v4054 = vadd.f32 0.0, %v4053
  %4055 = vmatprep.mubr.bf16.mxu0 %v3882
  %4056 = vmatmul.mubr.bf16.gmra.mxu0 %v3881
  %v4057 = vpop.f32.mrf.mxu0
  %v4058 = vadd.f32 0.0, %v4057
  %v4059 = vpop.f32.mrf.mxu0
  %v4060 = vadd.f32 0.0, %v4059
  %v4061 = vpop.f32.mrf.mxu0
  %v4062 = vadd.f32 0.0, %v4061
  %v4063 = vpop.f32.mrf.mxu0
  %v4064 = vadd.f32 0.0, %v4063
  %4065 = vmatprep.mubr.bf16.mxu0 %v3886
  %4066 = vmatmul.mubr.bf16.gmra.mxu0 %v3885
  %v4067 = vpop.f32.mrf.mxu0
  %v4068 = vadd.f32 0.0, %v4067
  %v4069 = vpop.f32.mrf.mxu0
  %v4070 = vadd.f32 0.0, %v4069
  %v4071 = vpop.f32.mrf.mxu0
  %v4072 = vadd.f32 0.0, %v4071
  %v4073 = vpop.f32.mrf.mxu0
  %v4074 = vadd.f32 0.0, %v4073
  %4075 = vmatprep.mubr.bf16.mxu0 %v3890
  %4076 = vmatmul.mubr.bf16.gmra.mxu0 %v3889
  %v4077 = vpop.f32.mrf.mxu0
  %v4078 = vadd.f32 0.0, %v4077
  %v4079 = vpop.f32.mrf.mxu0
  %v4080 = vadd.f32 0.0, %v4079
  %v4081 = vpop.f32.mrf.mxu0
  %v4082 = vadd.f32 0.0, %v4081
  %v4083 = vpop.f32.mrf.mxu0
  %v4084 = vadd.f32 0.0, %v4083
  %4085 = vdwg.mxu0
  %4086 = vmatprep.subr.bf16.mxu0 %v3758
  %4087 = vmatpush1.bf16.msra.mxu0 %v3757
  %4088 = vmatprep.subr.bf16.mxu0 %v3750
  %4089 = vmatpush1.bf16.msra.mxu0 %v3749
  %4090 = vmatprep.subr.bf16.mxu0 %v3742
  %4091 = vmatpush1.bf16.msra.mxu0 %v3741
  %4092 = vmatprep.subr.bf16.mxu0 %v3734
  %4093 = vmatpush1.bf16.msra.mxu0 %v3733
  %4094 = vmatprep.subr.bf16.mxu0 %v3726
  %4095 = vmatpush1.bf16.msra.mxu0 %v3725
  %4096 = vmatprep.subr.bf16.mxu0 %v3718
  %4097 = vmatpush1.bf16.msra.mxu0 %v3717
  %4098 = vmatprep.subr.bf16.mxu0 %v3710
  %4099 = vmatpush1.bf16.msra.mxu0 %v3709
  %4100 = vmatprep.subr.bf16.mxu0 %v3702
  %4101 = vmatpush1.bf16.msra.mxu0 %v3701
  %4102 = vmatprep.subr.bf16.mxu0 %v3822
  %4103 = vmatpush2.bf16.msra.mxu0 %v3821
  %4104 = vmatprep.subr.bf16.mxu0 %v3814
  %4105 = vmatpush2.bf16.msra.mxu0 %v3813
  %4106 = vmatprep.subr.bf16.mxu0 %v3806
  %4107 = vmatpush2.bf16.msra.mxu0 %v3805
  %4108 = vmatprep.subr.bf16.mxu0 %v3798
  %4109 = vmatpush2.bf16.msra.mxu0 %v3797
  %4110 = vmatprep.subr.bf16.mxu0 %v3790
  %4111 = vmatpush2.bf16.msra.mxu0 %v3789
  %4112 = vmatprep.subr.bf16.mxu0 %v3782
  %4113 = vmatpush2.bf16.msra.mxu0 %v3781
  %4114 = vmatprep.subr.bf16.mxu0 %v3774
  %4115 = vmatpush2.bf16.msra.mxu0 %v3773
  %4116 = vmatprep.subr.bf16.mxu0 %v3766
  %4117 = vmatpush2.bf16.msra.mxu0 %v3765
  %4118 = vmatprep.mubr.bf16.mxu0 %v3832
  %4119 = vmatmul.mubr.bf16.gmra.mxu0 %v3831
  %v4120 = vpop.f32.mrf.mxu0
  %v4121 = vadd.f32 %v3928, %v4120
  %v4122 = vpop.f32.mrf.mxu0
  %v4123 = vadd.f32 %v3930, %v4122
  %v4124 = vpop.f32.mrf.mxu0
  %v4125 = vadd.f32 %v3932, %v4124
  %v4126 = vpop.f32.mrf.mxu0
  %v4127 = vadd.f32 %v3934, %v4126
  %4128 = vmatprep.mubr.bf16.mxu0 %v3836
  %4129 = vmatmul.mubr.bf16.gmra.mxu0 %v3835
  %v4130 = vpop.f32.mrf.mxu0
  %v4131 = vadd.f32 %v3938, %v4130
  %v4132 = vpop.f32.mrf.mxu0
  %v4133 = vadd.f32 %v3940, %v4132
  %v4134 = vpop.f32.mrf.mxu0
  %v4135 = vadd.f32 %v3942, %v4134
  %v4136 = vpop.f32.mrf.mxu0
  %v4137 = vadd.f32 %v3944, %v4136
  %4138 = vmatprep.mubr.bf16.mxu0 %v3840
  %4139 = vmatmul.mubr.bf16.gmra.mxu0 %v3839
  %v4140 = vpop.f32.mrf.mxu0
  %v4141 = vadd.f32 %v3948, %v4140
  %v4142 = vpop.f32.mrf.mxu0
  %v4143 = vadd.f32 %v3950, %v4142
  %v4144 = vpop.f32.mrf.mxu0
  %v4145 = vadd.f32 %v3952, %v4144
  %v4146 = vpop.f32.mrf.mxu0
  %v4147 = vadd.f32 %v3954, %v4146
  %4148 = vmatprep.mubr.bf16.mxu0 %v3844
  %4149 = vmatmul.mubr.bf16.gmra.mxu0 %v3843
  %v4150 = vpop.f32.mrf.mxu0
  %v4151 = vadd.f32 %v3958, %v4150
  %v4152 = vpop.f32.mrf.mxu0
  %v4153 = vadd.f32 %v3960, %v4152
  %v4154 = vpop.f32.mrf.mxu0
  %v4155 = vadd.f32 %v3962, %v4154
  %v4156 = vpop.f32.mrf.mxu0
  %v4157 = vadd.f32 %v3964, %v4156
  %4158 = vmatprep.mubr.bf16.mxu0 %v3848
  %4159 = vmatmul.mubr.bf16.gmra.mxu0 %v3847
  %v4160 = vpop.f32.mrf.mxu0
  %v4161 = vadd.f32 %v3968, %v4160
  %v4162 = vpop.f32.mrf.mxu0
  %v4163 = vadd.f32 %v3970, %v4162
  %v4164 = vpop.f32.mrf.mxu0
  %v4165 = vadd.f32 %v3972, %v4164
  %v4166 = vpop.f32.mrf.mxu0
  %v4167 = vadd.f32 %v3974, %v4166
  %4168 = vmatprep.mubr.bf16.mxu0 %v3852
  %4169 = vmatmul.mubr.bf16.gmra.mxu0 %v3851
  %v4170 = vpop.f32.mrf.mxu0
  %v4171 = vadd.f32 %v3978, %v4170
  %v4172 = vpop.f32.mrf.mxu0
  %v4173 = vadd.f32 %v3980, %v4172
  %v4174 = vpop.f32.mrf.mxu0
  %v4175 = vadd.f32 %v3982, %v4174
  %v4176 = vpop.f32.mrf.mxu0
  %v4177 = vadd.f32 %v3984, %v4176
  %4178 = vmatprep.mubr.bf16.mxu0 %v3856
  %4179 = vmatmul.mubr.bf16.gmra.mxu0 %v3855
  %v4180 = vpop.f32.mrf.mxu0
  %v4181 = vadd.f32 %v3988, %v4180
  %v4182 = vpop.f32.mrf.mxu0
  %v4183 = vadd.f32 %v3990, %v4182
  %v4184 = vpop.f32.mrf.mxu0
  %v4185 = vadd.f32 %v3992, %v4184
  %v4186 = vpop.f32.mrf.mxu0
  %v4187 = vadd.f32 %v3994, %v4186
  %4188 = vmatprep.mubr.bf16.mxu0 %v3860
  %4189 = vmatmul.mubr.bf16.gmra.mxu0 %v3859
  %v4190 = vpop.f32.mrf.mxu0
  %v4191 = vadd.f32 %v3998, %v4190
  %v4192 = vpop.f32.mrf.mxu0
  %v4193 = vadd.f32 %v4000, %v4192
  %v4194 = vpop.f32.mrf.mxu0
  %v4195 = vadd.f32 %v4002, %v4194
  %v4196 = vpop.f32.mrf.mxu0
  %v4197 = vadd.f32 %v4004, %v4196
  %4198 = vmatprep.mubr.bf16.mxu0 %v3864
  %4199 = vmatmul.mubr.bf16.gmra.mxu0 %v3863
  %v4200 = vpop.f32.mrf.mxu0
  %v4201 = vadd.f32 %v4008, %v4200
  %v4202 = vpop.f32.mrf.mxu0
  %v4203 = vadd.f32 %v4010, %v4202
  %v4204 = vpop.f32.mrf.mxu0
  %v4205 = vadd.f32 %v4012, %v4204
  %v4206 = vpop.f32.mrf.mxu0
  %v4207 = vadd.f32 %v4014, %v4206
  %4208 = vmatprep.mubr.bf16.mxu0 %v3868
  %4209 = vmatmul.mubr.bf16.gmra.mxu0 %v3867
  %v4210 = vpop.f32.mrf.mxu0
  %v4211 = vadd.f32 %v4018, %v4210
  %v4212 = vpop.f32.mrf.mxu0
  %v4213 = vadd.f32 %v4020, %v4212
  %v4214 = vpop.f32.mrf.mxu0
  %v4215 = vadd.f32 %v4022, %v4214
  %v4216 = vpop.f32.mrf.mxu0
  %v4217 = vadd.f32 %v4024, %v4216
  %4218 = vmatprep.mubr.bf16.mxu0 %v3872
  %4219 = vmatmul.mubr.bf16.gmra.mxu0 %v3871
  %v4220 = vpop.f32.mrf.mxu0
  %v4221 = vadd.f32 %v4028, %v4220
  %v4222 = vpop.f32.mrf.mxu0
  %v4223 = vadd.f32 %v4030, %v4222
  %v4224 = vpop.f32.mrf.mxu0
  %v4225 = vadd.f32 %v4032, %v4224
  %v4226 = vpop.f32.mrf.mxu0
  %v4227 = vadd.f32 %v4034, %v4226
  %4228 = vmatprep.mubr.bf16.mxu0 %v3876
  %4229 = vmatmul.mubr.bf16.gmra.mxu0 %v3875
  %v4230 = vpop.f32.mrf.mxu0
  %v4231 = vadd.f32 %v4038, %v4230
  %v4232 = vpop.f32.mrf.mxu0
  %v4233 = vadd.f32 %v4040, %v4232
  %v4234 = vpop.f32.mrf.mxu0
  %v4235 = vadd.f32 %v4042, %v4234
  %v4236 = vpop.f32.mrf.mxu0
  %v4237 = vadd.f32 %v4044, %v4236
  %4238 = vmatprep.mubr.bf16.mxu0 %v3880
  %4239 = vmatmul.mubr.bf16.gmra.mxu0 %v3879
  %v4240 = vpop.f32.mrf.mxu0
  %v4241 = vadd.f32 %v4048, %v4240
  %v4242 = vpop.f32.mrf.mxu0
  %v4243 = vadd.f32 %v4050, %v4242
  %v4244 = vpop.f32.mrf.mxu0
  %v4245 = vadd.f32 %v4052, %v4244
  %v4246 = vpop.f32.mrf.mxu0
  %v4247 = vadd.f32 %v4054, %v4246
  %4248 = vmatprep.mubr.bf16.mxu0 %v3884
  %4249 = vmatmul.mubr.bf16.gmra.mxu0 %v3883
  %v4250 = vpop.f32.mrf.mxu0
  %v4251 = vadd.f32 %v4058, %v4250
  %v4252 = vpop.f32.mrf.mxu0
  %v4253 = vadd.f32 %v4060, %v4252
  %v4254 = vpop.f32.mrf.mxu0
  %v4255 = vadd.f32 %v4062, %v4254
  %v4256 = vpop.f32.mrf.mxu0
  %v4257 = vadd.f32 %v4064, %v4256
  %4258 = vmatprep.mubr.bf16.mxu0 %v3888
  %4259 = vmatmul.mubr.bf16.gmra.mxu0 %v3887
  %v4260 = vpop.f32.mrf.mxu0
  %v4261 = vadd.f32 %v4068, %v4260
  %v4262 = vpop.f32.mrf.mxu0
  %v4263 = vadd.f32 %v4070, %v4262
  %v4264 = vpop.f32.mrf.mxu0
  %v4265 = vadd.f32 %v4072, %v4264
  %v4266 = vpop.f32.mrf.mxu0
  %v4267 = vadd.f32 %v4074, %v4266
  %4268 = vmatprep.mubr.bf16.mxu0 %v3892
  %4269 = vmatmul.mubr.bf16.gmra.mxu0 %v3891
  %v4270 = vpop.f32.mrf.mxu0
  %v4271 = vadd.f32 %v4078, %v4270
  %v4272 = vpop.f32.mrf.mxu0
  %v4273 = vadd.f32 %v4080, %v4272
  %v4274 = vpop.f32.mrf.mxu0
  %v4275 = vadd.f32 %v4082, %v4274
  %v4276 = vpop.f32.mrf.mxu0
  %v4277 = vadd.f32 %v4084, %v4276
  %4278 = vdwg.mxu0
  %4279 = vmatprep.subr.bf16.mxu0 %v3632
  %4280 = vmatpush1.bf16.msra.mxu0 %v3631
  %4281 = vmatprep.subr.bf16.mxu0 %v3624
  %4282 = vmatpush1.bf16.msra.mxu0 %v3623
  %4283 = vmatprep.subr.bf16.mxu0 %v3616
  %4284 = vmatpush1.bf16.msra.mxu0 %v3615
  %4285 = vmatprep.subr.bf16.mxu0 %v3608
  %4286 = vmatpush1.bf16.msra.mxu0 %v3607
  %4287 = vmatprep.subr.bf16.mxu0 %v3600
  %4288 = vmatpush1.bf16.msra.mxu0 %v3599
  %4289 = vmatprep.subr.bf16.mxu0 %v3592
  %4290 = vmatpush1.bf16.msra.mxu0 %v3591
  %4291 = vmatprep.subr.bf16.mxu0 %v3584
  %4292 = vmatpush1.bf16.msra.mxu0 %v3583
  %4293 = vmatprep.subr.bf16.mxu0 %v3576
  %4294 = vmatpush1.bf16.msra.mxu0 %v3575
  %4295 = vmatprep.subr.bf16.mxu0 %v3696
  %4296 = vmatpush2.bf16.msra.mxu0 %v3695
  %4297 = vmatprep.subr.bf16.mxu0 %v3688
  %4298 = vmatpush2.bf16.msra.mxu0 %v3687
  %4299 = vmatprep.subr.bf16.mxu0 %v3680
  %4300 = vmatpush2.bf16.msra.mxu0 %v3679
  %4301 = vmatprep.subr.bf16.mxu0 %v3672
  %4302 = vmatpush2.bf16.msra.mxu0 %v3671
  %4303 = vmatprep.subr.bf16.mxu0 %v3664
  %4304 = vmatpush2.bf16.msra.mxu0 %v3663
  %4305 = vmatprep.subr.bf16.mxu0 %v3656
  %4306 = vmatpush2.bf16.msra.mxu0 %v3655
  %4307 = vmatprep.subr.bf16.mxu0 %v3648
  %4308 = vmatpush2.bf16.msra.mxu0 %v3647
  %4309 = vmatprep.subr.bf16.mxu0 %v3640
  %4310 = vmatpush2.bf16.msra.mxu0 %v3639
  %4311 = vmatprep.mubr.bf16.mxu0 %v3830
  %4312 = vmatmul.mubr.bf16.gmra.mxu0 %v3829
  %v4313 = vpop.f32.mrf.mxu0
  %v4314 = vadd.f32 0.0, %v4313
  %v4315 = vpop.f32.mrf.mxu0
  %v4316 = vadd.f32 0.0, %v4315
  %v4317 = vpop.f32.mrf.mxu0
  %v4318 = vadd.f32 0.0, %v4317
  %v4319 = vpop.f32.mrf.mxu0
  %v4320 = vadd.f32 0.0, %v4319
  %4321 = vmatprep.mubr.bf16.mxu0 %v3834
  %4322 = vmatmul.mubr.bf16.gmra.mxu0 %v3833
  %v4323 = vpop.f32.mrf.mxu0
  %v4324 = vadd.f32 0.0, %v4323
  %v4325 = vpop.f32.mrf.mxu0
  %v4326 = vadd.f32 0.0, %v4325
  %v4327 = vpop.f32.mrf.mxu0
  %v4328 = vadd.f32 0.0, %v4327
  %v4329 = vpop.f32.mrf.mxu0
  %v4330 = vadd.f32 0.0, %v4329
  %4331 = vmatprep.mubr.bf16.mxu0 %v3838
  %4332 = vmatmul.mubr.bf16.gmra.mxu0 %v3837
  %v4333 = vpop.f32.mrf.mxu0
  %v4334 = vadd.f32 0.0, %v4333
  %v4335 = vpop.f32.mrf.mxu0
  %v4336 = vadd.f32 0.0, %v4335
  %v4337 = vpop.f32.mrf.mxu0
  %v4338 = vadd.f32 0.0, %v4337
  %v4339 = vpop.f32.mrf.mxu0
  %v4340 = vadd.f32 0.0, %v4339
  %4341 = vmatprep.mubr.bf16.mxu0 %v3842
  %4342 = vmatmul.mubr.bf16.gmra.mxu0 %v3841
  %v4343 = vpop.f32.mrf.mxu0
  %v4344 = vadd.f32 0.0, %v4343
  %v4345 = vpop.f32.mrf.mxu0
  %v4346 = vadd.f32 0.0, %v4345
  %v4347 = vpop.f32.mrf.mxu0
  %v4348 = vadd.f32 0.0, %v4347
  %v4349 = vpop.f32.mrf.mxu0
  %v4350 = vadd.f32 0.0, %v4349
  %4351 = vmatprep.mubr.bf16.mxu0 %v3846
  %4352 = vmatmul.mubr.bf16.gmra.mxu0 %v3845
  %v4353 = vpop.f32.mrf.mxu0
  %v4354 = vadd.f32 0.0, %v4353
  %v4355 = vpop.f32.mrf.mxu0
  %v4356 = vadd.f32 0.0, %v4355
  %v4357 = vpop.f32.mrf.mxu0
  %v4358 = vadd.f32 0.0, %v4357
  %v4359 = vpop.f32.mrf.mxu0
  %v4360 = vadd.f32 0.0, %v4359
  %4361 = vmatprep.mubr.bf16.mxu0 %v3850
  %4362 = vmatmul.mubr.bf16.gmra.mxu0 %v3849
  %v4363 = vpop.f32.mrf.mxu0
  %v4364 = vadd.f32 0.0, %v4363
  %v4365 = vpop.f32.mrf.mxu0
  %v4366 = vadd.f32 0.0, %v4365
  %v4367 = vpop.f32.mrf.mxu0
  %v4368 = vadd.f32 0.0, %v4367
  %v4369 = vpop.f32.mrf.mxu0
  %v4370 = vadd.f32 0.0, %v4369
  %4371 = vmatprep.mubr.bf16.mxu0 %v3854
  %4372 = vmatmul.mubr.bf16.gmra.mxu0 %v3853
  %v4373 = vpop.f32.mrf.mxu0
  %v4374 = vadd.f32 0.0, %v4373
  %v4375 = vpop.f32.mrf.mxu0
  %v4376 = vadd.f32 0.0, %v4375
  %v4377 = vpop.f32.mrf.mxu0
  %v4378 = vadd.f32 0.0, %v4377
  %v4379 = vpop.f32.mrf.mxu0
  %v4380 = vadd.f32 0.0, %v4379
  %4381 = vmatprep.mubr.bf16.mxu0 %v3858
  %4382 = vmatmul.mubr.bf16.gmra.mxu0 %v3857
  %v4383 = vpop.f32.mrf.mxu0
  %v4384 = vadd.f32 0.0, %v4383
  %v4385 = vpop.f32.mrf.mxu0
  %v4386 = vadd.f32 0.0, %v4385
  %v4387 = vpop.f32.mrf.mxu0
  %v4388 = vadd.f32 0.0, %v4387
  %v4389 = vpop.f32.mrf.mxu0
  %v4390 = vadd.f32 0.0, %v4389
  %4391 = vmatprep.mubr.bf16.mxu0 %v3862
  %4392 = vmatmul.mubr.bf16.gmra.mxu0 %v3861
  %v4393 = vpop.f32.mrf.mxu0
  %v4394 = vadd.f32 0.0, %v4393
  %v4395 = vpop.f32.mrf.mxu0
  %v4396 = vadd.f32 0.0, %v4395
  %v4397 = vpop.f32.mrf.mxu0
  %v4398 = vadd.f32 0.0, %v4397
  %v4399 = vpop.f32.mrf.mxu0
  %v4400 = vadd.f32 0.0, %v4399
  %4401 = vmatprep.mubr.bf16.mxu0 %v3866
  %4402 = vmatmul.mubr.bf16.gmra.mxu0 %v3865
  %v4403 = vpop.f32.mrf.mxu0
  %v4404 = vadd.f32 0.0, %v4403
  %v4405 = vpop.f32.mrf.mxu0
  %v4406 = vadd.f32 0.0, %v4405
  %v4407 = vpop.f32.mrf.mxu0
  %v4408 = vadd.f32 0.0, %v4407
  %v4409 = vpop.f32.mrf.mxu0
  %v4410 = vadd.f32 0.0, %v4409
  %4411 = vmatprep.mubr.bf16.mxu0 %v3870
  %4412 = vmatmul.mubr.bf16.gmra.mxu0 %v3869
  %v4413 = vpop.f32.mrf.mxu0
  %v4414 = vadd.f32 0.0, %v4413
  %v4415 = vpop.f32.mrf.mxu0
  %v4416 = vadd.f32 0.0, %v4415
  %v4417 = vpop.f32.mrf.mxu0
  %v4418 = vadd.f32 0.0, %v4417
  %v4419 = vpop.f32.mrf.mxu0
  %v4420 = vadd.f32 0.0, %v4419
  %4421 = vmatprep.mubr.bf16.mxu0 %v3874
  %4422 = vmatmul.mubr.bf16.gmra.mxu0 %v3873
  %v4423 = vpop.f32.mrf.mxu0
  %v4424 = vadd.f32 0.0, %v4423
  %v4425 = vpop.f32.mrf.mxu0
  %v4426 = vadd.f32 0.0, %v4425
  %v4427 = vpop.f32.mrf.mxu0
  %v4428 = vadd.f32 0.0, %v4427
  %v4429 = vpop.f32.mrf.mxu0
  %v4430 = vadd.f32 0.0, %v4429
  %4431 = vmatprep.mubr.bf16.mxu0 %v3878
  %4432 = vmatmul.mubr.bf16.gmra.mxu0 %v3877
  %v4433 = vpop.f32.mrf.mxu0
  %v4434 = vadd.f32 0.0, %v4433
  %v4435 = vpop.f32.mrf.mxu0
  %v4436 = vadd.f32 0.0, %v4435
  %v4437 = vpop.f32.mrf.mxu0
  %v4438 = vadd.f32 0.0, %v4437
  %v4439 = vpop.f32.mrf.mxu0
  %v4440 = vadd.f32 0.0, %v4439
  %4441 = vmatprep.mubr.bf16.mxu0 %v3882
  %4442 = vmatmul.mubr.bf16.gmra.mxu0 %v3881
  %v4443 = vpop.f32.mrf.mxu0
  %v4444 = vadd.f32 0.0, %v4443
  %v4445 = vpop.f32.mrf.mxu0
  %v4446 = vadd.f32 0.0, %v4445
  %v4447 = vpop.f32.mrf.mxu0
  %v4448 = vadd.f32 0.0, %v4447
  %v4449 = vpop.f32.mrf.mxu0
  %v4450 = vadd.f32 0.0, %v4449
  %4451 = vmatprep.mubr.bf16.mxu0 %v3886
  %4452 = vmatmul.mubr.bf16.gmra.mxu0 %v3885
  %v4453 = vpop.f32.mrf.mxu0
  %v4454 = vadd.f32 0.0, %v4453
  %v4455 = vpop.f32.mrf.mxu0
  %v4456 = vadd.f32 0.0, %v4455
  %v4457 = vpop.f32.mrf.mxu0
  %v4458 = vadd.f32 0.0, %v4457
  %v4459 = vpop.f32.mrf.mxu0
  %v4460 = vadd.f32 0.0, %v4459
  %4461 = vmatprep.mubr.bf16.mxu0 %v3890
  %4462 = vmatmul.mubr.bf16.gmra.mxu0 %v3889
  %v4463 = vpop.f32.mrf.mxu0
  %v4464 = vadd.f32 0.0, %v4463
  %v4465 = vpop.f32.mrf.mxu0
  %v4466 = vadd.f32 0.0, %v4465
  %v4467 = vpop.f32.mrf.mxu0
  %v4468 = vadd.f32 0.0, %v4467
  %v4469 = vpop.f32.mrf.mxu0
  %v4470 = vadd.f32 0.0, %v4469
  %4471 = vdwg.mxu0
  %4472 = vmatprep.subr.bf16.mxu0 %v3760
  %4473 = vmatpush1.bf16.msra.mxu0 %v3759
  %4474 = vmatprep.subr.bf16.mxu0 %v3752
  %4475 = vmatpush1.bf16.msra.mxu0 %v3751
  %4476 = vmatprep.subr.bf16.mxu0 %v3744
  %4477 = vmatpush1.bf16.msra.mxu0 %v3743
  %4478 = vmatprep.subr.bf16.mxu0 %v3736
  %4479 = vmatpush1.bf16.msra.mxu0 %v3735
  %4480 = vmatprep.subr.bf16.mxu0 %v3728
  %4481 = vmatpush1.bf16.msra.mxu0 %v3727
  %4482 = vmatprep.subr.bf16.mxu0 %v3720
  %4483 = vmatpush1.bf16.msra.mxu0 %v3719
  %4484 = vmatprep.subr.bf16.mxu0 %v3712
  %4485 = vmatpush1.bf16.msra.mxu0 %v3711
  %4486 = vmatprep.subr.bf16.mxu0 %v3704
  %4487 = vmatpush1.bf16.msra.mxu0 %v3703
  %4488 = vmatprep.subr.bf16.mxu0 %v3824
  %4489 = vmatpush2.bf16.msra.mxu0 %v3823
  %4490 = vmatprep.subr.bf16.mxu0 %v3816
  %4491 = vmatpush2.bf16.msra.mxu0 %v3815
  %4492 = vmatprep.subr.bf16.mxu0 %v3808
  %4493 = vmatpush2.bf16.msra.mxu0 %v3807
  %4494 = vmatprep.subr.bf16.mxu0 %v3800
  %4495 = vmatpush2.bf16.msra.mxu0 %v3799
  %4496 = vmatprep.subr.bf16.mxu0 %v3792
  %4497 = vmatpush2.bf16.msra.mxu0 %v3791
  %4498 = vmatprep.subr.bf16.mxu0 %v3784
  %4499 = vmatpush2.bf16.msra.mxu0 %v3783
  %4500 = vmatprep.subr.bf16.mxu0 %v3776
  %4501 = vmatpush2.bf16.msra.mxu0 %v3775
  %4502 = vmatprep.subr.bf16.mxu0 %v3768
  %4503 = vmatpush2.bf16.msra.mxu0 %v3767
  %4504 = vmatprep.mubr.bf16.mxu0 %v3832
  %4505 = vmatmul.mubr.bf16.gmra.mxu0 %v3831
  %v4506 = vpop.f32.mrf.mxu0
  %v4507 = vadd.f32 %v4314, %v4506
  %v4508 = vpop.f32.mrf.mxu0
  %v4509 = vadd.f32 %v4316, %v4508
  %v4510 = vpop.f32.mrf.mxu0
  %v4511 = vadd.f32 %v4318, %v4510
  %v4512 = vpop.f32.mrf.mxu0
  %v4513 = vadd.f32 %v4320, %v4512
  %4514 = vmatprep.mubr.bf16.mxu0 %v3836
  %4515 = vmatmul.mubr.bf16.gmra.mxu0 %v3835
  %v4516 = vpop.f32.mrf.mxu0
  %v4517 = vadd.f32 %v4324, %v4516
  %v4518 = vpop.f32.mrf.mxu0
  %v4519 = vadd.f32 %v4326, %v4518
  %v4520 = vpop.f32.mrf.mxu0
  %v4521 = vadd.f32 %v4328, %v4520
  %v4522 = vpop.f32.mrf.mxu0
  %v4523 = vadd.f32 %v4330, %v4522
  %4524 = vmatprep.mubr.bf16.mxu0 %v3840
  %4525 = vmatmul.mubr.bf16.gmra.mxu0 %v3839
  %v4526 = vpop.f32.mrf.mxu0
  %v4527 = vadd.f32 %v4334, %v4526
  %v4528 = vpop.f32.mrf.mxu0
  %v4529 = vadd.f32 %v4336, %v4528
  %v4530 = vpop.f32.mrf.mxu0
  %v4531 = vadd.f32 %v4338, %v4530
  %v4532 = vpop.f32.mrf.mxu0
  %v4533 = vadd.f32 %v4340, %v4532
  %4534 = vmatprep.mubr.bf16.mxu0 %v3844
  %4535 = vmatmul.mubr.bf16.gmra.mxu0 %v3843
  %v4536 = vpop.f32.mrf.mxu0
  %v4537 = vadd.f32 %v4344, %v4536
  %v4538 = vpop.f32.mrf.mxu0
  %v4539 = vadd.f32 %v4346, %v4538
  %v4540 = vpop.f32.mrf.mxu0
  %v4541 = vadd.f32 %v4348, %v4540
  %v4542 = vpop.f32.mrf.mxu0
  %v4543 = vadd.f32 %v4350, %v4542
  %4544 = vmatprep.mubr.bf16.mxu0 %v3848
  %4545 = vmatmul.mubr.bf16.gmra.mxu0 %v3847
  %v4546 = vpop.f32.mrf.mxu0
  %v4547 = vadd.f32 %v4354, %v4546
  %v4548 = vpop.f32.mrf.mxu0
  %v4549 = vadd.f32 %v4356, %v4548
  %v4550 = vpop.f32.mrf.mxu0
  %v4551 = vadd.f32 %v4358, %v4550
  %v4552 = vpop.f32.mrf.mxu0
  %v4553 = vadd.f32 %v4360, %v4552
  %4554 = vmatprep.mubr.bf16.mxu0 %v3852
  %4555 = vmatmul.mubr.bf16.gmra.mxu0 %v3851
  %v4556 = vpop.f32.mrf.mxu0
  %v4557 = vadd.f32 %v4364, %v4556
  %v4558 = vpop.f32.mrf.mxu0
  %v4559 = vadd.f32 %v4366, %v4558
  %v4560 = vpop.f32.mrf.mxu0
  %v4561 = vadd.f32 %v4368, %v4560
  %v4562 = vpop.f32.mrf.mxu0
  %v4563 = vadd.f32 %v4370, %v4562
  %4564 = vmatprep.mubr.bf16.mxu0 %v3856
  %4565 = vmatmul.mubr.bf16.gmra.mxu0 %v3855
  %v4566 = vpop.f32.mrf.mxu0
  %v4567 = vadd.f32 %v4374, %v4566
  %v4568 = vpop.f32.mrf.mxu0
  %v4569 = vadd.f32 %v4376, %v4568
  %v4570 = vpop.f32.mrf.mxu0
  %v4571 = vadd.f32 %v4378, %v4570
  %v4572 = vpop.f32.mrf.mxu0
  %v4573 = vadd.f32 %v4380, %v4572
  %4574 = vmatprep.mubr.bf16.mxu0 %v3860
  %4575 = vmatmul.mubr.bf16.gmra.mxu0 %v3859
  %v4576 = vpop.f32.mrf.mxu0
  %v4577 = vadd.f32 %v4384, %v4576
  %v4578 = vpop.f32.mrf.mxu0
  %v4579 = vadd.f32 %v4386, %v4578
  %v4580 = vpop.f32.mrf.mxu0
  %v4581 = vadd.f32 %v4388, %v4580
  %v4582 = vpop.f32.mrf.mxu0
  %v4583 = vadd.f32 %v4390, %v4582
  %4584 = vmatprep.mubr.bf16.mxu0 %v3864
  %4585 = vmatmul.mubr.bf16.gmra.mxu0 %v3863
  %v4586 = vpop.f32.mrf.mxu0
  %v4587 = vadd.f32 %v4394, %v4586
  %v4588 = vpop.f32.mrf.mxu0
  %v4589 = vadd.f32 %v4396, %v4588
  %v4590 = vpop.f32.mrf.mxu0
  %v4591 = vadd.f32 %v4398, %v4590
  %v4592 = vpop.f32.mrf.mxu0
  %v4593 = vadd.f32 %v4400, %v4592
  %4594 = vmatprep.mubr.bf16.mxu0 %v3868
  %4595 = vmatmul.mubr.bf16.gmra.mxu0 %v3867
  %v4596 = vpop.f32.mrf.mxu0
  %v4597 = vadd.f32 %v4404, %v4596
  %v4598 = vpop.f32.mrf.mxu0
  %v4599 = vadd.f32 %v4406, %v4598
  %v4600 = vpop.f32.mrf.mxu0
  %v4601 = vadd.f32 %v4408, %v4600
  %v4602 = vpop.f32.mrf.mxu0
  %v4603 = vadd.f32 %v4410, %v4602
  %4604 = vmatprep.mubr.bf16.mxu0 %v3872
  %4605 = vmatmul.mubr.bf16.gmra.mxu0 %v3871
  %v4606 = vpop.f32.mrf.mxu0
  %v4607 = vadd.f32 %v4414, %v4606
  %v4608 = vpop.f32.mrf.mxu0
  %v4609 = vadd.f32 %v4416, %v4608
  %v4610 = vpop.f32.mrf.mxu0
  %v4611 = vadd.f32 %v4418, %v4610
  %v4612 = vpop.f32.mrf.mxu0
  %v4613 = vadd.f32 %v4420, %v4612
  %4614 = vmatprep.mubr.bf16.mxu0 %v3876
  %4615 = vmatmul.mubr.bf16.gmra.mxu0 %v3875
  %v4616 = vpop.f32.mrf.mxu0
  %v4617 = vadd.f32 %v4424, %v4616
  %v4618 = vpop.f32.mrf.mxu0
  %v4619 = vadd.f32 %v4426, %v4618
  %v4620 = vpop.f32.mrf.mxu0
  %v4621 = vadd.f32 %v4428, %v4620
  %v4622 = vpop.f32.mrf.mxu0
  %v4623 = vadd.f32 %v4430, %v4622
  %4624 = vmatprep.mubr.bf16.mxu0 %v3880
  %4625 = vmatmul.mubr.bf16.gmra.mxu0 %v3879
  %v4626 = vpop.f32.mrf.mxu0
  %v4627 = vadd.f32 %v4434, %v4626
  %v4628 = vpop.f32.mrf.mxu0
  %v4629 = vadd.f32 %v4436, %v4628
  %v4630 = vpop.f32.mrf.mxu0
  %v4631 = vadd.f32 %v4438, %v4630
  %v4632 = vpop.f32.mrf.mxu0
  %v4633 = vadd.f32 %v4440, %v4632
  %4634 = vmatprep.mubr.bf16.mxu0 %v3884
  %4635 = vmatmul.mubr.bf16.gmra.mxu0 %v3883
  %v4636 = vpop.f32.mrf.mxu0
  %v4637 = vadd.f32 %v4444, %v4636
  %v4638 = vpop.f32.mrf.mxu0
  %v4639 = vadd.f32 %v4446, %v4638
  %v4640 = vpop.f32.mrf.mxu0
  %v4641 = vadd.f32 %v4448, %v4640
  %v4642 = vpop.f32.mrf.mxu0
  %v4643 = vadd.f32 %v4450, %v4642
  %4644 = vmatprep.mubr.bf16.mxu0 %v3888
  %4645 = vmatmul.mubr.bf16.gmra.mxu0 %v3887
  %v4646 = vpop.f32.mrf.mxu0
  %v4647 = vadd.f32 %v4454, %v4646
  %v4648 = vpop.f32.mrf.mxu0
  %v4649 = vadd.f32 %v4456, %v4648
  %v4650 = vpop.f32.mrf.mxu0
  %v4651 = vadd.f32 %v4458, %v4650
  %v4652 = vpop.f32.mrf.mxu0
  %v4653 = vadd.f32 %v4460, %v4652
  %4654 = vmatprep.mubr.bf16.mxu0 %v3892
  %4655 = vmatmul.mubr.bf16.gmra.mxu0 %v3891
  %v4656 = vpop.f32.mrf.mxu0
  %v4657 = vadd.f32 %v4464, %v4656
  %v4658 = vpop.f32.mrf.mxu0
  %v4659 = vadd.f32 %v4466, %v4658
  %v4660 = vpop.f32.mrf.mxu0
  %v4661 = vadd.f32 %v4468, %v4660
  %v4662 = vpop.f32.mrf.mxu0
  %v4663 = vadd.f32 %v4470, %v4662
  %4664 = vdwg.mxu0
  %4665 = vmatprep.subr.bf16.mxu0 %v3634
  %4666 = vmatpush1.bf16.msra.mxu0 %v3633
  %4667 = vmatprep.subr.bf16.mxu0 %v3626
  %4668 = vmatpush1.bf16.msra.mxu0 %v3625
  %4669 = vmatprep.subr.bf16.mxu0 %v3618
  %4670 = vmatpush1.bf16.msra.mxu0 %v3617
  %4671 = vmatprep.subr.bf16.mxu0 %v3610
  %4672 = vmatpush1.bf16.msra.mxu0 %v3609
  %4673 = vmatprep.subr.bf16.mxu0 %v3602
  %4674 = vmatpush1.bf16.msra.mxu0 %v3601
  %4675 = vmatprep.subr.bf16.mxu0 %v3594
  %4676 = vmatpush1.bf16.msra.mxu0 %v3593
  %4677 = vmatprep.subr.bf16.mxu0 %v3586
  %4678 = vmatpush1.bf16.msra.mxu0 %v3585
  %4679 = vmatprep.subr.bf16.mxu0 %v3578
  %4680 = vmatpush1.bf16.msra.mxu0 %v3577
  %4681 = vmatprep.subr.bf16.mxu0 %v3698
  %4682 = vmatpush2.bf16.msra.mxu0 %v3697
  %4683 = vmatprep.subr.bf16.mxu0 %v3690
  %4684 = vmatpush2.bf16.msra.mxu0 %v3689
  %4685 = vmatprep.subr.bf16.mxu0 %v3682
  %4686 = vmatpush2.bf16.msra.mxu0 %v3681
  %4687 = vmatprep.subr.bf16.mxu0 %v3674
  %4688 = vmatpush2.bf16.msra.mxu0 %v3673
  %4689 = vmatprep.subr.bf16.mxu0 %v3666
  %4690 = vmatpush2.bf16.msra.mxu0 %v3665
  %4691 = vmatprep.subr.bf16.mxu0 %v3658
  %4692 = vmatpush2.bf16.msra.mxu0 %v3657
  %4693 = vmatprep.subr.bf16.mxu0 %v3650
  %4694 = vmatpush2.bf16.msra.mxu0 %v3649
  %4695 = vmatprep.subr.bf16.mxu0 %v3642
  %4696 = vmatpush2.bf16.msra.mxu0 %v3641
  %4697 = vmatprep.mubr.bf16.mxu0 %v3830
  %4698 = vmatmul.mubr.bf16.gmra.mxu0 %v3829
  %v4699 = vpop.f32.mrf.mxu0
  %v4700 = vadd.f32 0.0, %v4699
  %v4701 = vpop.f32.mrf.mxu0
  %v4702 = vadd.f32 0.0, %v4701
  %v4703 = vpop.f32.mrf.mxu0
  %v4704 = vadd.f32 0.0, %v4703
  %v4705 = vpop.f32.mrf.mxu0
  %v4706 = vadd.f32 0.0, %v4705
  %4707 = vmatprep.mubr.bf16.mxu0 %v3834
  %4708 = vmatmul.mubr.bf16.gmra.mxu0 %v3833
  %v4709 = vpop.f32.mrf.mxu0
  %v4710 = vadd.f32 0.0, %v4709
  %v4711 = vpop.f32.mrf.mxu0
  %v4712 = vadd.f32 0.0, %v4711
  %v4713 = vpop.f32.mrf.mxu0
  %v4714 = vadd.f32 0.0, %v4713
  %v4715 = vpop.f32.mrf.mxu0
  %v4716 = vadd.f32 0.0, %v4715
  %4717 = vmatprep.mubr.bf16.mxu0 %v3838
  %4718 = vmatmul.mubr.bf16.gmra.mxu0 %v3837
  %v4719 = vpop.f32.mrf.mxu0
  %v4720 = vadd.f32 0.0, %v4719
  %v4721 = vpop.f32.mrf.mxu0
  %v4722 = vadd.f32 0.0, %v4721
  %v4723 = vpop.f32.mrf.mxu0
  %v4724 = vadd.f32 0.0, %v4723
  %v4725 = vpop.f32.mrf.mxu0
  %v4726 = vadd.f32 0.0, %v4725
  %4727 = vmatprep.mubr.bf16.mxu0 %v3842
  %4728 = vmatmul.mubr.bf16.gmra.mxu0 %v3841
  %v4729 = vpop.f32.mrf.mxu0
  %v4730 = vadd.f32 0.0, %v4729
  %v4731 = vpop.f32.mrf.mxu0
  %v4732 = vadd.f32 0.0, %v4731
  %v4733 = vpop.f32.mrf.mxu0
  %v4734 = vadd.f32 0.0, %v4733
  %v4735 = vpop.f32.mrf.mxu0
  %v4736 = vadd.f32 0.0, %v4735
  %4737 = vmatprep.mubr.bf16.mxu0 %v3846
  %4738 = vmatmul.mubr.bf16.gmra.mxu0 %v3845
  %v4739 = vpop.f32.mrf.mxu0
  %v4740 = vadd.f32 0.0, %v4739
  %v4741 = vpop.f32.mrf.mxu0
  %v4742 = vadd.f32 0.0, %v4741
  %v4743 = vpop.f32.mrf.mxu0
  %v4744 = vadd.f32 0.0, %v4743
  %v4745 = vpop.f32.mrf.mxu0
  %v4746 = vadd.f32 0.0, %v4745
  %4747 = vmatprep.mubr.bf16.mxu0 %v3850
  %4748 = vmatmul.mubr.bf16.gmra.mxu0 %v3849
  %v4749 = vpop.f32.mrf.mxu0
  %v4750 = vadd.f32 0.0, %v4749
  %v4751 = vpop.f32.mrf.mxu0
  %v4752 = vadd.f32 0.0, %v4751
  %v4753 = vpop.f32.mrf.mxu0
  %v4754 = vadd.f32 0.0, %v4753
  %v4755 = vpop.f32.mrf.mxu0
  %v4756 = vadd.f32 0.0, %v4755
  %4757 = vmatprep.mubr.bf16.mxu0 %v3854
  %4758 = vmatmul.mubr.bf16.gmra.mxu0 %v3853
  %v4759 = vpop.f32.mrf.mxu0
  %v4760 = vadd.f32 0.0, %v4759
  %v4761 = vpop.f32.mrf.mxu0
  %v4762 = vadd.f32 0.0, %v4761
  %v4763 = vpop.f32.mrf.mxu0
  %v4764 = vadd.f32 0.0, %v4763
  %v4765 = vpop.f32.mrf.mxu0
  %v4766 = vadd.f32 0.0, %v4765
  %4767 = vmatprep.mubr.bf16.mxu0 %v3858
  %4768 = vmatmul.mubr.bf16.gmra.mxu0 %v3857
  %v4769 = vpop.f32.mrf.mxu0
  %v4770 = vadd.f32 0.0, %v4769
  %v4771 = vpop.f32.mrf.mxu0
  %v4772 = vadd.f32 0.0, %v4771
  %v4773 = vpop.f32.mrf.mxu0
  %v4774 = vadd.f32 0.0, %v4773
  %v4775 = vpop.f32.mrf.mxu0
  %v4776 = vadd.f32 0.0, %v4775
  %4777 = vmatprep.mubr.bf16.mxu0 %v3862
  %4778 = vmatmul.mubr.bf16.gmra.mxu0 %v3861
  %v4779 = vpop.f32.mrf.mxu0
  %v4780 = vadd.f32 0.0, %v4779
  %v4781 = vpop.f32.mrf.mxu0
  %v4782 = vadd.f32 0.0, %v4781
  %v4783 = vpop.f32.mrf.mxu0
  %v4784 = vadd.f32 0.0, %v4783
  %v4785 = vpop.f32.mrf.mxu0
  %v4786 = vadd.f32 0.0, %v4785
  %4787 = vmatprep.mubr.bf16.mxu0 %v3866
  %4788 = vmatmul.mubr.bf16.gmra.mxu0 %v3865
  %v4789 = vpop.f32.mrf.mxu0
  %v4790 = vadd.f32 0.0, %v4789
  %v4791 = vpop.f32.mrf.mxu0
  %v4792 = vadd.f32 0.0, %v4791
  %v4793 = vpop.f32.mrf.mxu0
  %v4794 = vadd.f32 0.0, %v4793
  %v4795 = vpop.f32.mrf.mxu0
  %v4796 = vadd.f32 0.0, %v4795
  %4797 = vmatprep.mubr.bf16.mxu0 %v3870
  %4798 = vmatmul.mubr.bf16.gmra.mxu0 %v3869
  %v4799 = vpop.f32.mrf.mxu0
  %v4800 = vadd.f32 0.0, %v4799
  %v4801 = vpop.f32.mrf.mxu0
  %v4802 = vadd.f32 0.0, %v4801
  %v4803 = vpop.f32.mrf.mxu0
  %v4804 = vadd.f32 0.0, %v4803
  %v4805 = vpop.f32.mrf.mxu0
  %v4806 = vadd.f32 0.0, %v4805
  %4807 = vmatprep.mubr.bf16.mxu0 %v3874
  %4808 = vmatmul.mubr.bf16.gmra.mxu0 %v3873
  %v4809 = vpop.f32.mrf.mxu0
  %v4810 = vadd.f32 0.0, %v4809
  %v4811 = vpop.f32.mrf.mxu0
  %v4812 = vadd.f32 0.0, %v4811
  %v4813 = vpop.f32.mrf.mxu0
  %v4814 = vadd.f32 0.0, %v4813
  %v4815 = vpop.f32.mrf.mxu0
  %v4816 = vadd.f32 0.0, %v4815
  %4817 = vmatprep.mubr.bf16.mxu0 %v3878
  %4818 = vmatmul.mubr.bf16.gmra.mxu0 %v3877
  %v4819 = vpop.f32.mrf.mxu0
  %v4820 = vadd.f32 0.0, %v4819
  %v4821 = vpop.f32.mrf.mxu0
  %v4822 = vadd.f32 0.0, %v4821
  %v4823 = vpop.f32.mrf.mxu0
  %v4824 = vadd.f32 0.0, %v4823
  %v4825 = vpop.f32.mrf.mxu0
  %v4826 = vadd.f32 0.0, %v4825
  %4827 = vmatprep.mubr.bf16.mxu0 %v3882
  %4828 = vmatmul.mubr.bf16.gmra.mxu0 %v3881
  %v4829 = vpop.f32.mrf.mxu0
  %v4830 = vadd.f32 0.0, %v4829
  %v4831 = vpop.f32.mrf.mxu0
  %v4832 = vadd.f32 0.0, %v4831
  %v4833 = vpop.f32.mrf.mxu0
  %v4834 = vadd.f32 0.0, %v4833
  %v4835 = vpop.f32.mrf.mxu0
  %v4836 = vadd.f32 0.0, %v4835
  %4837 = vmatprep.mubr.bf16.mxu0 %v3886
  %4838 = vmatmul.mubr.bf16.gmra.mxu0 %v3885
  %v4839 = vpop.f32.mrf.mxu0
  %v4840 = vadd.f32 0.0, %v4839
  %v4841 = vpop.f32.mrf.mxu0
  %v4842 = vadd.f32 0.0, %v4841
  %v4843 = vpop.f32.mrf.mxu0
  %v4844 = vadd.f32 0.0, %v4843
  %v4845 = vpop.f32.mrf.mxu0
  %v4846 = vadd.f32 0.0, %v4845
  %4847 = vmatprep.mubr.bf16.mxu0 %v3890
  %4848 = vmatmul.mubr.bf16.gmra.mxu0 %v3889
  %v4849 = vpop.f32.mrf.mxu0
  %v4850 = vadd.f32 0.0, %v4849
  %v4851 = vpop.f32.mrf.mxu0
  %v4852 = vadd.f32 0.0, %v4851
  %v4853 = vpop.f32.mrf.mxu0
  %v4854 = vadd.f32 0.0, %v4853
  %v4855 = vpop.f32.mrf.mxu0
  %v4856 = vadd.f32 0.0, %v4855
  %4857 = vdwg.mxu0
  %4858 = vmatprep.subr.bf16.mxu0 %v3762
  %4859 = vmatpush1.bf16.msra.mxu0 %v3761
  %4860 = vmatprep.subr.bf16.mxu0 %v3754
  %4861 = vmatpush1.bf16.msra.mxu0 %v3753
  %4862 = vmatprep.subr.bf16.mxu0 %v3746
  %4863 = vmatpush1.bf16.msra.mxu0 %v3745
  %4864 = vmatprep.subr.bf16.mxu0 %v3738
  %4865 = vmatpush1.bf16.msra.mxu0 %v3737
  %4866 = vmatprep.subr.bf16.mxu0 %v3730
  %4867 = vmatpush1.bf16.msra.mxu0 %v3729
  %4868 = vmatprep.subr.bf16.mxu0 %v3722
  %4869 = vmatpush1.bf16.msra.mxu0 %v3721
  %4870 = vmatprep.subr.bf16.mxu0 %v3714
  %4871 = vmatpush1.bf16.msra.mxu0 %v3713
  %4872 = vmatprep.subr.bf16.mxu0 %v3706
  %4873 = vmatpush1.bf16.msra.mxu0 %v3705
  %4874 = vmatprep.subr.bf16.mxu0 %v3826
  %4875 = vmatpush2.bf16.msra.mxu0 %v3825
  %4876 = vmatprep.subr.bf16.mxu0 %v3818
  %4877 = vmatpush2.bf16.msra.mxu0 %v3817
  %4878 = vmatprep.subr.bf16.mxu0 %v3810
  %4879 = vmatpush2.bf16.msra.mxu0 %v3809
  %4880 = vmatprep.subr.bf16.mxu0 %v3802
  %4881 = vmatpush2.bf16.msra.mxu0 %v3801
  %4882 = vmatprep.subr.bf16.mxu0 %v3794
  %4883 = vmatpush2.bf16.msra.mxu0 %v3793
  %4884 = vmatprep.subr.bf16.mxu0 %v3786
  %4885 = vmatpush2.bf16.msra.mxu0 %v3785
  %4886 = vmatprep.subr.bf16.mxu0 %v3778
  %4887 = vmatpush2.bf16.msra.mxu0 %v3777
  %4888 = vmatprep.subr.bf16.mxu0 %v3770
  %4889 = vmatpush2.bf16.msra.mxu0 %v3769
  %4890 = vmatprep.mubr.bf16.mxu0 %v3832
  %4891 = vmatmul.mubr.bf16.gmra.mxu0 %v3831
  %v4892 = vpop.f32.mrf.mxu0
  %v4893 = vadd.f32 %v4700, %v4892
  %v4894 = vpop.f32.mrf.mxu0
  %v4895 = vadd.f32 %v4702, %v4894
  %v4896 = vpop.f32.mrf.mxu0
  %v4897 = vadd.f32 %v4704, %v4896
  %v4898 = vpop.f32.mrf.mxu0
  %v4899 = vadd.f32 %v4706, %v4898
  %4900 = vmatprep.mubr.bf16.mxu0 %v3836
  %4901 = vmatmul.mubr.bf16.gmra.mxu0 %v3835
  %v4902 = vpop.f32.mrf.mxu0
  %v4903 = vadd.f32 %v4710, %v4902
  %v4904 = vpop.f32.mrf.mxu0
  %v4905 = vadd.f32 %v4712, %v4904
  %v4906 = vpop.f32.mrf.mxu0
  %v4907 = vadd.f32 %v4714, %v4906
  %v4908 = vpop.f32.mrf.mxu0
  %v4909 = vadd.f32 %v4716, %v4908
  %4910 = vmatprep.mubr.bf16.mxu0 %v3840
  %4911 = vmatmul.mubr.bf16.gmra.mxu0 %v3839
  %v4912 = vpop.f32.mrf.mxu0
  %v4913 = vadd.f32 %v4720, %v4912
  %v4914 = vpop.f32.mrf.mxu0
  %v4915 = vadd.f32 %v4722, %v4914
  %v4916 = vpop.f32.mrf.mxu0
  %v4917 = vadd.f32 %v4724, %v4916
  %v4918 = vpop.f32.mrf.mxu0
  %v4919 = vadd.f32 %v4726, %v4918
  %4920 = vmatprep.mubr.bf16.mxu0 %v3844
  %4921 = vmatmul.mubr.bf16.gmra.mxu0 %v3843
  %v4922 = vpop.f32.mrf.mxu0
  %v4923 = vadd.f32 %v4730, %v4922
  %v4924 = vpop.f32.mrf.mxu0
  %v4925 = vadd.f32 %v4732, %v4924
  %v4926 = vpop.f32.mrf.mxu0
  %v4927 = vadd.f32 %v4734, %v4926
  %v4928 = vpop.f32.mrf.mxu0
  %v4929 = vadd.f32 %v4736, %v4928
  %4930 = vmatprep.mubr.bf16.mxu0 %v3848
  %4931 = vmatmul.mubr.bf16.gmra.mxu0 %v3847
  %v4932 = vpop.f32.mrf.mxu0
  %v4933 = vadd.f32 %v4740, %v4932
  %v4934 = vpop.f32.mrf.mxu0
  %v4935 = vadd.f32 %v4742, %v4934
  %v4936 = vpop.f32.mrf.mxu0
  %v4937 = vadd.f32 %v4744, %v4936
  %v4938 = vpop.f32.mrf.mxu0
  %v4939 = vadd.f32 %v4746, %v4938
  %4940 = vmatprep.mubr.bf16.mxu0 %v3852
  %4941 = vmatmul.mubr.bf16.gmra.mxu0 %v3851
  %v4942 = vpop.f32.mrf.mxu0
  %v4943 = vadd.f32 %v4750, %v4942
  %v4944 = vpop.f32.mrf.mxu0
  %v4945 = vadd.f32 %v4752, %v4944
  %v4946 = vpop.f32.mrf.mxu0
  %v4947 = vadd.f32 %v4754, %v4946
  %v4948 = vpop.f32.mrf.mxu0
  %v4949 = vadd.f32 %v4756, %v4948
  %4950 = vmatprep.mubr.bf16.mxu0 %v3856
  %4951 = vmatmul.mubr.bf16.gmra.mxu0 %v3855
  %v4952 = vpop.f32.mrf.mxu0
  %v4953 = vadd.f32 %v4760, %v4952
  %v4954 = vpop.f32.mrf.mxu0
  %v4955 = vadd.f32 %v4762, %v4954
  %v4956 = vpop.f32.mrf.mxu0
  %v4957 = vadd.f32 %v4764, %v4956
  %v4958 = vpop.f32.mrf.mxu0
  %v4959 = vadd.f32 %v4766, %v4958
  %4960 = vmatprep.mubr.bf16.mxu0 %v3860
  %4961 = vmatmul.mubr.bf16.gmra.mxu0 %v3859
  %v4962 = vpop.f32.mrf.mxu0
  %v4963 = vadd.f32 %v4770, %v4962
  %v4964 = vpop.f32.mrf.mxu0
  %v4965 = vadd.f32 %v4772, %v4964
  %v4966 = vpop.f32.mrf.mxu0
  %v4967 = vadd.f32 %v4774, %v4966
  %v4968 = vpop.f32.mrf.mxu0
  %v4969 = vadd.f32 %v4776, %v4968
  %4970 = vmatprep.mubr.bf16.mxu0 %v3864
  %4971 = vmatmul.mubr.bf16.gmra.mxu0 %v3863
  %v4972 = vpop.f32.mrf.mxu0
  %v4973 = vadd.f32 %v4780, %v4972
  %v4974 = vpop.f32.mrf.mxu0
  %v4975 = vadd.f32 %v4782, %v4974
  %v4976 = vpop.f32.mrf.mxu0
  %v4977 = vadd.f32 %v4784, %v4976
  %v4978 = vpop.f32.mrf.mxu0
  %v4979 = vadd.f32 %v4786, %v4978
  %4980 = vmatprep.mubr.bf16.mxu0 %v3868
  %4981 = vmatmul.mubr.bf16.gmra.mxu0 %v3867
  %v4982 = vpop.f32.mrf.mxu0
  %v4983 = vadd.f32 %v4790, %v4982
  %v4984 = vpop.f32.mrf.mxu0
  %v4985 = vadd.f32 %v4792, %v4984
  %v4986 = vpop.f32.mrf.mxu0
  %v4987 = vadd.f32 %v4794, %v4986
  %v4988 = vpop.f32.mrf.mxu0
  %v4989 = vadd.f32 %v4796, %v4988
  %4990 = vmatprep.mubr.bf16.mxu0 %v3872
  %4991 = vmatmul.mubr.bf16.gmra.mxu0 %v3871
  %v4992 = vpop.f32.mrf.mxu0
  %v4993 = vadd.f32 %v4800, %v4992
  %v4994 = vpop.f32.mrf.mxu0
  %v4995 = vadd.f32 %v4802, %v4994
  %v4996 = vpop.f32.mrf.mxu0
  %v4997 = vadd.f32 %v4804, %v4996
  %v4998 = vpop.f32.mrf.mxu0
  %v4999 = vadd.f32 %v4806, %v4998
  %5000 = vmatprep.mubr.bf16.mxu0 %v3876
  %5001 = vmatmul.mubr.bf16.gmra.mxu0 %v3875
  %v5002 = vpop.f32.mrf.mxu0
  %v5003 = vadd.f32 %v4810, %v5002
  %v5004 = vpop.f32.mrf.mxu0
  %v5005 = vadd.f32 %v4812, %v5004
  %v5006 = vpop.f32.mrf.mxu0
  %v5007 = vadd.f32 %v4814, %v5006
  %v5008 = vpop.f32.mrf.mxu0
  %v5009 = vadd.f32 %v4816, %v5008
  %5010 = vmatprep.mubr.bf16.mxu0 %v3880
  %5011 = vmatmul.mubr.bf16.gmra.mxu0 %v3879
  %v5012 = vpop.f32.mrf.mxu0
  %v5013 = vadd.f32 %v4820, %v5012
  %v5014 = vpop.f32.mrf.mxu0
  %v5015 = vadd.f32 %v4822, %v5014
  %v5016 = vpop.f32.mrf.mxu0
  %v5017 = vadd.f32 %v4824, %v5016
  %v5018 = vpop.f32.mrf.mxu0
  %v5019 = vadd.f32 %v4826, %v5018
  %5020 = vmatprep.mubr.bf16.mxu0 %v3884
  %5021 = vmatmul.mubr.bf16.gmra.mxu0 %v3883
  %v5022 = vpop.f32.mrf.mxu0
  %v5023 = vadd.f32 %v4830, %v5022
  %v5024 = vpop.f32.mrf.mxu0
  %v5025 = vadd.f32 %v4832, %v5024
  %v5026 = vpop.f32.mrf.mxu0
  %v5027 = vadd.f32 %v4834, %v5026
  %v5028 = vpop.f32.mrf.mxu0
  %v5029 = vadd.f32 %v4836, %v5028
  %5030 = vmatprep.mubr.bf16.mxu0 %v3888
  %5031 = vmatmul.mubr.bf16.gmra.mxu0 %v3887
  %v5032 = vpop.f32.mrf.mxu0
  %v5033 = vadd.f32 %v4840, %v5032
  %v5034 = vpop.f32.mrf.mxu0
  %v5035 = vadd.f32 %v4842, %v5034
  %v5036 = vpop.f32.mrf.mxu0
  %v5037 = vadd.f32 %v4844, %v5036
  %v5038 = vpop.f32.mrf.mxu0
  %v5039 = vadd.f32 %v4846, %v5038
  %5040 = vmatprep.mubr.bf16.mxu0 %v3892
  %5041 = vmatmul.mubr.bf16.gmra.mxu0 %v3891
  %v5042 = vpop.f32.mrf.mxu0
  %v5043 = vadd.f32 %v4850, %v5042
  %v5044 = vpop.f32.mrf.mxu0
  %v5045 = vadd.f32 %v4852, %v5044
  %v5046 = vpop.f32.mrf.mxu0
  %v5047 = vadd.f32 %v4854, %v5046
  %v5048 = vpop.f32.mrf.mxu0
  %v5049 = vadd.f32 %v4856, %v5048
  %5050 = vdwg.mxu0
  %5051 = vmatprep.subr.bf16.mxu0 %v3636
  %5052 = vmatpush1.bf16.msra.mxu0 %v3635
  %5053 = vmatprep.subr.bf16.mxu0 %v3628
  %5054 = vmatpush1.bf16.msra.mxu0 %v3627
  %5055 = vmatprep.subr.bf16.mxu0 %v3620
  %5056 = vmatpush1.bf16.msra.mxu0 %v3619
  %5057 = vmatprep.subr.bf16.mxu0 %v3612
  %5058 = vmatpush1.bf16.msra.mxu0 %v3611
  %5059 = vmatprep.subr.bf16.mxu0 %v3604
  %5060 = vmatpush1.bf16.msra.mxu0 %v3603
  %5061 = vmatprep.subr.bf16.mxu0 %v3596
  %5062 = vmatpush1.bf16.msra.mxu0 %v3595
  %5063 = vmatprep.subr.bf16.mxu0 %v3588
  %5064 = vmatpush1.bf16.msra.mxu0 %v3587
  %5065 = vmatprep.subr.bf16.mxu0 %v3580
  %5066 = vmatpush1.bf16.msra.mxu0 %v3579
  %5067 = vmatprep.subr.bf16.mxu0 %v3700
  %5068 = vmatpush2.bf16.msra.mxu0 %v3699
  %5069 = vmatprep.subr.bf16.mxu0 %v3692
  %5070 = vmatpush2.bf16.msra.mxu0 %v3691
  %5071 = vmatprep.subr.bf16.mxu0 %v3684
  %5072 = vmatpush2.bf16.msra.mxu0 %v3683
  %5073 = vmatprep.subr.bf16.mxu0 %v3676
  %5074 = vmatpush2.bf16.msra.mxu0 %v3675
  %5075 = vmatprep.subr.bf16.mxu0 %v3668
  %5076 = vmatpush2.bf16.msra.mxu0 %v3667
  %5077 = vmatprep.subr.bf16.mxu0 %v3660
  %5078 = vmatpush2.bf16.msra.mxu0 %v3659
  %5079 = vmatprep.subr.bf16.mxu0 %v3652
  %5080 = vmatpush2.bf16.msra.mxu0 %v3651
  %5081 = vmatprep.subr.bf16.mxu0 %v3644
  %5082 = vmatpush2.bf16.msra.mxu0 %v3643
  %5083 = vmatprep.mubr.bf16.mxu0 %v3830
  %5084 = vmatmul.mubr.bf16.gmra.mxu0 %v3829
  %v5085 = vpop.f32.mrf.mxu0
  %v5086 = vadd.f32 0.0, %v5085
  %v5087 = vpop.f32.mrf.mxu0
  %v5088 = vadd.f32 0.0, %v5087
  %v5089 = vpop.f32.mrf.mxu0
  %v5090 = vadd.f32 0.0, %v5089
  %v5091 = vpop.f32.mrf.mxu0
  %v5092 = vadd.f32 0.0, %v5091
  %5093 = vmatprep.mubr.bf16.mxu0 %v3834
  %5094 = vmatmul.mubr.bf16.gmra.mxu0 %v3833
  %v5095 = vpop.f32.mrf.mxu0
  %v5096 = vadd.f32 0.0, %v5095
  %v5097 = vpop.f32.mrf.mxu0
  %v5098 = vadd.f32 0.0, %v5097
  %v5099 = vpop.f32.mrf.mxu0
  %v5100 = vadd.f32 0.0, %v5099
  %v5101 = vpop.f32.mrf.mxu0
  %v5102 = vadd.f32 0.0, %v5101
  %5103 = vmatprep.mubr.bf16.mxu0 %v3838
  %5104 = vmatmul.mubr.bf16.gmra.mxu0 %v3837
  %v5105 = vpop.f32.mrf.mxu0
  %v5106 = vadd.f32 0.0, %v5105
  %v5107 = vpop.f32.mrf.mxu0
  %v5108 = vadd.f32 0.0, %v5107
  %v5109 = vpop.f32.mrf.mxu0
  %v5110 = vadd.f32 0.0, %v5109
  %v5111 = vpop.f32.mrf.mxu0
  %v5112 = vadd.f32 0.0, %v5111
  %5113 = vmatprep.mubr.bf16.mxu0 %v3842
  %5114 = vmatmul.mubr.bf16.gmra.mxu0 %v3841
  %v5115 = vpop.f32.mrf.mxu0
  %v5116 = vadd.f32 0.0, %v5115
  %v5117 = vpop.f32.mrf.mxu0
  %v5118 = vadd.f32 0.0, %v5117
  %v5119 = vpop.f32.mrf.mxu0
  %v5120 = vadd.f32 0.0, %v5119
  %v5121 = vpop.f32.mrf.mxu0
  %v5122 = vadd.f32 0.0, %v5121
  %5123 = vmatprep.mubr.bf16.mxu0 %v3846
  %5124 = vmatmul.mubr.bf16.gmra.mxu0 %v3845
  %v5125 = vpop.f32.mrf.mxu0
  %v5126 = vadd.f32 0.0, %v5125
  %v5127 = vpop.f32.mrf.mxu0
  %v5128 = vadd.f32 0.0, %v5127
  %v5129 = vpop.f32.mrf.mxu0
  %v5130 = vadd.f32 0.0, %v5129
  %v5131 = vpop.f32.mrf.mxu0
  %v5132 = vadd.f32 0.0, %v5131
  %5133 = vmatprep.mubr.bf16.mxu0 %v3850
  %5134 = vmatmul.mubr.bf16.gmra.mxu0 %v3849
  %v5135 = vpop.f32.mrf.mxu0
  %v5136 = vadd.f32 0.0, %v5135
  %v5137 = vpop.f32.mrf.mxu0
  %v5138 = vadd.f32 0.0, %v5137
  %v5139 = vpop.f32.mrf.mxu0
  %v5140 = vadd.f32 0.0, %v5139
  %v5141 = vpop.f32.mrf.mxu0
  %v5142 = vadd.f32 0.0, %v5141
  %5143 = vmatprep.mubr.bf16.mxu0 %v3854
  %5144 = vmatmul.mubr.bf16.gmra.mxu0 %v3853
  %v5145 = vpop.f32.mrf.mxu0
  %v5146 = vadd.f32 0.0, %v5145
  %v5147 = vpop.f32.mrf.mxu0
  %v5148 = vadd.f32 0.0, %v5147
  %v5149 = vpop.f32.mrf.mxu0
  %v5150 = vadd.f32 0.0, %v5149
  %v5151 = vpop.f32.mrf.mxu0
  %v5152 = vadd.f32 0.0, %v5151
  %5153 = vmatprep.mubr.bf16.mxu0 %v3858
  %5154 = vmatmul.mubr.bf16.gmra.mxu0 %v3857
  %v5155 = vpop.f32.mrf.mxu0
  %v5156 = vadd.f32 0.0, %v5155
  %v5157 = vpop.f32.mrf.mxu0
  %v5158 = vadd.f32 0.0, %v5157
  %v5159 = vpop.f32.mrf.mxu0
  %v5160 = vadd.f32 0.0, %v5159
  %v5161 = vpop.f32.mrf.mxu0
  %v5162 = vadd.f32 0.0, %v5161
  %5163 = vmatprep.mubr.bf16.mxu0 %v3862
  %5164 = vmatmul.mubr.bf16.gmra.mxu0 %v3861
  %v5165 = vpop.f32.mrf.mxu0
  %v5166 = vadd.f32 0.0, %v5165
  %v5167 = vpop.f32.mrf.mxu0
  %v5168 = vadd.f32 0.0, %v5167
  %v5169 = vpop.f32.mrf.mxu0
  %v5170 = vadd.f32 0.0, %v5169
  %v5171 = vpop.f32.mrf.mxu0
  %v5172 = vadd.f32 0.0, %v5171
  %5173 = vmatprep.mubr.bf16.mxu0 %v3866
  %5174 = vmatmul.mubr.bf16.gmra.mxu0 %v3865
  %v5175 = vpop.f32.mrf.mxu0
  %v5176 = vadd.f32 0.0, %v5175
  %v5177 = vpop.f32.mrf.mxu0
  %v5178 = vadd.f32 0.0, %v5177
  %v5179 = vpop.f32.mrf.mxu0
  %v5180 = vadd.f32 0.0, %v5179
  %v5181 = vpop.f32.mrf.mxu0
  %v5182 = vadd.f32 0.0, %v5181
  %5183 = vmatprep.mubr.bf16.mxu0 %v3870
  %5184 = vmatmul.mubr.bf16.gmra.mxu0 %v3869
  %v5185 = vpop.f32.mrf.mxu0
  %v5186 = vadd.f32 0.0, %v5185
  %v5187 = vpop.f32.mrf.mxu0
  %v5188 = vadd.f32 0.0, %v5187
  %v5189 = vpop.f32.mrf.mxu0
  %v5190 = vadd.f32 0.0, %v5189
  %v5191 = vpop.f32.mrf.mxu0
  %v5192 = vadd.f32 0.0, %v5191
  %5193 = vmatprep.mubr.bf16.mxu0 %v3874
  %5194 = vmatmul.mubr.bf16.gmra.mxu0 %v3873
  %v5195 = vpop.f32.mrf.mxu0
  %v5196 = vadd.f32 0.0, %v5195
  %v5197 = vpop.f32.mrf.mxu0
  %v5198 = vadd.f32 0.0, %v5197
  %v5199 = vpop.f32.mrf.mxu0
  %v5200 = vadd.f32 0.0, %v5199
  %v5201 = vpop.f32.mrf.mxu0
  %v5202 = vadd.f32 0.0, %v5201
  %5203 = vmatprep.mubr.bf16.mxu0 %v3878
  %5204 = vmatmul.mubr.bf16.gmra.mxu0 %v3877
  %v5205 = vpop.f32.mrf.mxu0
  %v5206 = vadd.f32 0.0, %v5205
  %v5207 = vpop.f32.mrf.mxu0
  %v5208 = vadd.f32 0.0, %v5207
  %v5209 = vpop.f32.mrf.mxu0
  %v5210 = vadd.f32 0.0, %v5209
  %v5211 = vpop.f32.mrf.mxu0
  %v5212 = vadd.f32 0.0, %v5211
  %5213 = vmatprep.mubr.bf16.mxu0 %v3882
  %5214 = vmatmul.mubr.bf16.gmra.mxu0 %v3881
  %v5215 = vpop.f32.mrf.mxu0
  %v5216 = vadd.f32 0.0, %v5215
  %v5217 = vpop.f32.mrf.mxu0
  %v5218 = vadd.f32 0.0, %v5217
  %v5219 = vpop.f32.mrf.mxu0
  %v5220 = vadd.f32 0.0, %v5219
  %v5221 = vpop.f32.mrf.mxu0
  %v5222 = vadd.f32 0.0, %v5221
  %5223 = vmatprep.mubr.bf16.mxu0 %v3886
  %5224 = vmatmul.mubr.bf16.gmra.mxu0 %v3885
  %v5225 = vpop.f32.mrf.mxu0
  %v5226 = vadd.f32 0.0, %v5225
  %v5227 = vpop.f32.mrf.mxu0
  %v5228 = vadd.f32 0.0, %v5227
  %v5229 = vpop.f32.mrf.mxu0
  %v5230 = vadd.f32 0.0, %v5229
  %v5231 = vpop.f32.mrf.mxu0
  %v5232 = vadd.f32 0.0, %v5231
  %5233 = vmatprep.mubr.bf16.mxu0 %v3890
  %5234 = vmatmul.mubr.bf16.gmra.mxu0 %v3889
  %v5235 = vpop.f32.mrf.mxu0
  %v5236 = vadd.f32 0.0, %v5235
  %v5237 = vpop.f32.mrf.mxu0
  %v5238 = vadd.f32 0.0, %v5237
  %v5239 = vpop.f32.mrf.mxu0
  %v5240 = vadd.f32 0.0, %v5239
  %v5241 = vpop.f32.mrf.mxu0
  %v5242 = vadd.f32 0.0, %v5241
  %5243 = vdwg.mxu0
  %5244 = vmatprep.subr.bf16.mxu0 %v3764
  %5245 = vmatpush1.bf16.msra.mxu0 %v3763
  %5246 = vmatprep.subr.bf16.mxu0 %v3756
  %5247 = vmatpush1.bf16.msra.mxu0 %v3755
  %5248 = vmatprep.subr.bf16.mxu0 %v3748
  %5249 = vmatpush1.bf16.msra.mxu0 %v3747
  %5250 = vmatprep.subr.bf16.mxu0 %v3740
  %5251 = vmatpush1.bf16.msra.mxu0 %v3739
  %5252 = vmatprep.subr.bf16.mxu0 %v3732
  %5253 = vmatpush1.bf16.msra.mxu0 %v3731
  %5254 = vmatprep.subr.bf16.mxu0 %v3724
  %5255 = vmatpush1.bf16.msra.mxu0 %v3723
  %5256 = vmatprep.subr.bf16.mxu0 %v3716
  %5257 = vmatpush1.bf16.msra.mxu0 %v3715
  %5258 = vmatprep.subr.bf16.mxu0 %v3708
  %5259 = vmatpush1.bf16.msra.mxu0 %v3707
  %5260 = vmatprep.subr.bf16.mxu0 %v3828
  %5261 = vmatpush2.bf16.msra.mxu0 %v3827
  %5262 = vmatprep.subr.bf16.mxu0 %v3820
  %5263 = vmatpush2.bf16.msra.mxu0 %v3819
  %5264 = vmatprep.subr.bf16.mxu0 %v3812
  %5265 = vmatpush2.bf16.msra.mxu0 %v3811
  %5266 = vmatprep.subr.bf16.mxu0 %v3804
  %5267 = vmatpush2.bf16.msra.mxu0 %v3803
  %5268 = vmatprep.subr.bf16.mxu0 %v3796
  %5269 = vmatpush2.bf16.msra.mxu0 %v3795
  %5270 = vmatprep.subr.bf16.mxu0 %v3788
  %5271 = vmatpush2.bf16.msra.mxu0 %v3787
  %5272 = vmatprep.subr.bf16.mxu0 %v3780
  %5273 = vmatpush2.bf16.msra.mxu0 %v3779
  %5274 = vmatprep.subr.bf16.mxu0 %v3772
  %5275 = vmatpush2.bf16.msra.mxu0 %v3771
  %5276 = vmatprep.mubr.bf16.mxu0 %v3832
  %5277 = vmatmul.mubr.bf16.gmra.mxu0 %v3831
  %v5278 = vpop.f32.mrf.mxu0
  %v5279 = vadd.f32 %v5086, %v5278
  %v5280 = vpop.f32.mrf.mxu0
  %v5281 = vadd.f32 %v5088, %v5280
  %v5282 = vpop.f32.mrf.mxu0
  %v5283 = vadd.f32 %v5090, %v5282
  %v5284 = vpop.f32.mrf.mxu0
  %v5285 = vadd.f32 %v5092, %v5284
  %5286 = vmatprep.mubr.bf16.mxu0 %v3836
  %5287 = vmatmul.mubr.bf16.gmra.mxu0 %v3835
  %v5288 = vpop.f32.mrf.mxu0
  %v5289 = vadd.f32 %v5096, %v5288
  %v5290 = vpop.f32.mrf.mxu0
  %v5291 = vadd.f32 %v5098, %v5290
  %v5292 = vpop.f32.mrf.mxu0
  %v5293 = vadd.f32 %v5100, %v5292
  %v5294 = vpop.f32.mrf.mxu0
  %v5295 = vadd.f32 %v5102, %v5294
  %5296 = vmatprep.mubr.bf16.mxu0 %v3840
  %5297 = vmatmul.mubr.bf16.gmra.mxu0 %v3839
  %v5298 = vpop.f32.mrf.mxu0
  %v5299 = vadd.f32 %v5106, %v5298
  %v5300 = vpop.f32.mrf.mxu0
  %v5301 = vadd.f32 %v5108, %v5300
  %v5302 = vpop.f32.mrf.mxu0
  %v5303 = vadd.f32 %v5110, %v5302
  %v5304 = vpop.f32.mrf.mxu0
  %v5305 = vadd.f32 %v5112, %v5304
  %5306 = vmatprep.mubr.bf16.mxu0 %v3844
  %5307 = vmatmul.mubr.bf16.gmra.mxu0 %v3843
  %v5308 = vpop.f32.mrf.mxu0
  %v5309 = vadd.f32 %v5116, %v5308
  %v5310 = vpop.f32.mrf.mxu0
  %v5311 = vadd.f32 %v5118, %v5310
  %v5312 = vpop.f32.mrf.mxu0
  %v5313 = vadd.f32 %v5120, %v5312
  %v5314 = vpop.f32.mrf.mxu0
  %v5315 = vadd.f32 %v5122, %v5314
  %5316 = vmatprep.mubr.bf16.mxu0 %v3848
  %5317 = vmatmul.mubr.bf16.gmra.mxu0 %v3847
  %v5318 = vpop.f32.mrf.mxu0
  %v5319 = vadd.f32 %v5126, %v5318
  %v5320 = vpop.f32.mrf.mxu0
  %v5321 = vadd.f32 %v5128, %v5320
  %v5322 = vpop.f32.mrf.mxu0
  %v5323 = vadd.f32 %v5130, %v5322
  %v5324 = vpop.f32.mrf.mxu0
  %v5325 = vadd.f32 %v5132, %v5324
  %5326 = vmatprep.mubr.bf16.mxu0 %v3852
  %5327 = vmatmul.mubr.bf16.gmra.mxu0 %v3851
  %v5328 = vpop.f32.mrf.mxu0
  %v5329 = vadd.f32 %v5136, %v5328
  %v5330 = vpop.f32.mrf.mxu0
  %v5331 = vadd.f32 %v5138, %v5330
  %v5332 = vpop.f32.mrf.mxu0
  %v5333 = vadd.f32 %v5140, %v5332
  %v5334 = vpop.f32.mrf.mxu0
  %v5335 = vadd.f32 %v5142, %v5334
  %5336 = vmatprep.mubr.bf16.mxu0 %v3856
  %5337 = vmatmul.mubr.bf16.gmra.mxu0 %v3855
  %v5338 = vpop.f32.mrf.mxu0
  %v5339 = vadd.f32 %v5146, %v5338
  %v5340 = vpop.f32.mrf.mxu0
  %v5341 = vadd.f32 %v5148, %v5340
  %v5342 = vpop.f32.mrf.mxu0
  %v5343 = vadd.f32 %v5150, %v5342
  %v5344 = vpop.f32.mrf.mxu0
  %v5345 = vadd.f32 %v5152, %v5344
  %5346 = vmatprep.mubr.bf16.mxu0 %v3860
  %5347 = vmatmul.mubr.bf16.gmra.mxu0 %v3859
  %v5348 = vpop.f32.mrf.mxu0
  %v5349 = vadd.f32 %v5156, %v5348
  %v5350 = vpop.f32.mrf.mxu0
  %v5351 = vadd.f32 %v5158, %v5350
  %v5352 = vpop.f32.mrf.mxu0
  %v5353 = vadd.f32 %v5160, %v5352
  %v5354 = vpop.f32.mrf.mxu0
  %v5355 = vadd.f32 %v5162, %v5354
  %5356 = vmatprep.mubr.bf16.mxu0 %v3864
  %5357 = vmatmul.mubr.bf16.gmra.mxu0 %v3863
  %v5358 = vpop.f32.mrf.mxu0
  %v5359 = vadd.f32 %v5166, %v5358
  %v5360 = vpop.f32.mrf.mxu0
  %v5361 = vadd.f32 %v5168, %v5360
  %v5362 = vpop.f32.mrf.mxu0
  %v5363 = vadd.f32 %v5170, %v5362
  %v5364 = vpop.f32.mrf.mxu0
  %v5365 = vadd.f32 %v5172, %v5364
  %5366 = vmatprep.mubr.bf16.mxu0 %v3868
  %5367 = vmatmul.mubr.bf16.gmra.mxu0 %v3867
  %v5368 = vpop.f32.mrf.mxu0
  %v5369 = vadd.f32 %v5176, %v5368
  %v5370 = vpop.f32.mrf.mxu0
  %v5371 = vadd.f32 %v5178, %v5370
  %v5372 = vpop.f32.mrf.mxu0
  %v5373 = vadd.f32 %v5180, %v5372
  %v5374 = vpop.f32.mrf.mxu0
  %v5375 = vadd.f32 %v5182, %v5374
  %5376 = vmatprep.mubr.bf16.mxu0 %v3872
  %5377 = vmatmul.mubr.bf16.gmra.mxu0 %v3871
  %v5378 = vpop.f32.mrf.mxu0
  %v5379 = vadd.f32 %v5186, %v5378
  %v5380 = vpop.f32.mrf.mxu0
  %v5381 = vadd.f32 %v5188, %v5380
  %v5382 = vpop.f32.mrf.mxu0
  %v5383 = vadd.f32 %v5190, %v5382
  %v5384 = vpop.f32.mrf.mxu0
  %v5385 = vadd.f32 %v5192, %v5384
  %5386 = vmatprep.mubr.bf16.mxu0 %v3876
  %5387 = vmatmul.mubr.bf16.gmra.mxu0 %v3875
  %v5388 = vpop.f32.mrf.mxu0
  %v5389 = vadd.f32 %v5196, %v5388
  %v5390 = vpop.f32.mrf.mxu0
  %v5391 = vadd.f32 %v5198, %v5390
  %v5392 = vpop.f32.mrf.mxu0
  %v5393 = vadd.f32 %v5200, %v5392
  %v5394 = vpop.f32.mrf.mxu0
  %v5395 = vadd.f32 %v5202, %v5394
  %5396 = vmatprep.mubr.bf16.mxu0 %v3880
  %5397 = vmatmul.mubr.bf16.gmra.mxu0 %v3879
  %v5398 = vpop.f32.mrf.mxu0
  %v5399 = vadd.f32 %v5206, %v5398
  %v5400 = vpop.f32.mrf.mxu0
  %v5401 = vadd.f32 %v5208, %v5400
  %v5402 = vpop.f32.mrf.mxu0
  %v5403 = vadd.f32 %v5210, %v5402
  %v5404 = vpop.f32.mrf.mxu0
  %v5405 = vadd.f32 %v5212, %v5404
  %5406 = vmatprep.mubr.bf16.mxu0 %v3884
  %5407 = vmatmul.mubr.bf16.gmra.mxu0 %v3883
  %v5408 = vpop.f32.mrf.mxu0
  %v5409 = vadd.f32 %v5216, %v5408
  %v5410 = vpop.f32.mrf.mxu0
  %v5411 = vadd.f32 %v5218, %v5410
  %v5412 = vpop.f32.mrf.mxu0
  %v5413 = vadd.f32 %v5220, %v5412
  %v5414 = vpop.f32.mrf.mxu0
  %v5415 = vadd.f32 %v5222, %v5414
  %5416 = vmatprep.mubr.bf16.mxu0 %v3888
  %5417 = vmatmul.mubr.bf16.gmra.mxu0 %v3887
  %v5418 = vpop.f32.mrf.mxu0
  %v5419 = vadd.f32 %v5226, %v5418
  %v5420 = vpop.f32.mrf.mxu0
  %v5421 = vadd.f32 %v5228, %v5420
  %v5422 = vpop.f32.mrf.mxu0
  %v5423 = vadd.f32 %v5230, %v5422
  %v5424 = vpop.f32.mrf.mxu0
  %v5425 = vadd.f32 %v5232, %v5424
  %5426 = vmatprep.mubr.bf16.mxu0 %v3892
  %5427 = vmatmul.mubr.bf16.gmra.mxu0 %v3891
  %v5428 = vpop.f32.mrf.mxu0
  %v5429 = vadd.f32 %v5236, %v5428
  %v5430 = vpop.f32.mrf.mxu0
  %v5431 = vadd.f32 %v5238, %v5430
  %v5432 = vpop.f32.mrf.mxu0
  %v5433 = vadd.f32 %v5240, %v5432
  %v5434 = vpop.f32.mrf.mxu0
  %v5435 = vadd.f32 %v5242, %v5434
  %5436 = vdwg.mxu0
  %v5437 = vld [vmem:[%s10] sm:$0xff]
  %v5439 = vlaneseq
  %v5440 = vshrl.u32 %v5439, 7
  %v5441 = vsub.s32 0, %v5440
  %v5442 = vrot.slane %v5437, %v5441
  %v5443 = vlaneseq
  %v5444 = vshrl.u32 %v5443, 7
  %v5445 = vsub.s32 1, %v5444
  %v5446 = vrot.slane %v5437, %v5445
  %v5447 = vlaneseq
  %v5448 = vshrl.u32 %v5447, 7
  %v5449 = vsub.s32 2, %v5448
  %v5450 = vrot.slane %v5437, %v5449
  %v5451 = vlaneseq
  %v5452 = vshrl.u32 %v5451, 7
  %v5453 = vsub.s32 3, %v5452
  %v5454 = vrot.slane %v5437, %v5453
  %v5455 = vlaneseq
  %v5456 = vshrl.u32 %v5455, 7
  %v5457 = vsub.s32 4, %v5456
  %v5458 = vrot.slane %v5437, %v5457
  %v5459 = vlaneseq
  %v5460 = vshrl.u32 %v5459, 7
  %v5461 = vsub.s32 5, %v5460
  %v5462 = vrot.slane %v5437, %v5461
  %v5463 = vlaneseq
  %v5464 = vshrl.u32 %v5463, 7
  %v5465 = vsub.s32 6, %v5464
  %v5466 = vrot.slane %v5437, %v5465
  %v5467 = vlaneseq
  %v5468 = vshrl.u32 %v5467, 7
  %v5469 = vsub.s32 7, %v5468
  %v5470 = vrot.slane %v5437, %v5469
  %v5479 = vmul.f32 %v4121, %v5442
  %v5480 = vmul.f32 %v4123, %v5446
  %v5481 = vmul.f32 %v4507, %v5450
  %v5482 = vmul.f32 %v4509, %v5454
  %v5483 = vmul.f32 %v4893, %v5458
  %v5484 = vmul.f32 %v4895, %v5462
  %v5485 = vmul.f32 %v5279, %v5466
  %v5486 = vmul.f32 %v5281, %v5470
  %v5487 = vmul.f32 %v4125, %v5442
  %v5488 = vmul.f32 %v4127, %v5446
  %v5489 = vmul.f32 %v4511, %v5450
  %v5490 = vmul.f32 %v4513, %v5454
  %v5491 = vmul.f32 %v4897, %v5458
  %v5492 = vmul.f32 %v4899, %v5462
  %v5493 = vmul.f32 %v5283, %v5466
  %v5494 = vmul.f32 %v5285, %v5470
  %v5495 = vmul.f32 %v4131, %v5442
  %v5496 = vmul.f32 %v4133, %v5446
  %v5497 = vmul.f32 %v4517, %v5450
  %v5498 = vmul.f32 %v4519, %v5454
  %v5499 = vmul.f32 %v4903, %v5458
  %v5500 = vmul.f32 %v4905, %v5462
  %v5501 = vmul.f32 %v5289, %v5466
  %v5502 = vmul.f32 %v5291, %v5470
  %v5503 = vmul.f32 %v4135, %v5442
  %v5504 = vmul.f32 %v4137, %v5446
  %v5505 = vmul.f32 %v4521, %v5450
  %v5506 = vmul.f32 %v4523, %v5454
  %v5507 = vmul.f32 %v4907, %v5458
  %v5508 = vmul.f32 %v4909, %v5462
  %v5509 = vmul.f32 %v5293, %v5466
  %v5510 = vmul.f32 %v5295, %v5470
  %v5511 = vmul.f32 %v4141, %v5442
  %v5512 = vmul.f32 %v4143, %v5446
  %v5513 = vmul.f32 %v4527, %v5450
  %v5514 = vmul.f32 %v4529, %v5454
  %v5515 = vmul.f32 %v4913, %v5458
  %v5516 = vmul.f32 %v4915, %v5462
  %v5517 = vmul.f32 %v5299, %v5466
  %v5518 = vmul.f32 %v5301, %v5470
  %v5519 = vmul.f32 %v4145, %v5442
  %v5520 = vmul.f32 %v4147, %v5446
  %v5521 = vmul.f32 %v4531, %v5450
  %v5522 = vmul.f32 %v4533, %v5454
  %v5523 = vmul.f32 %v4917, %v5458
  %v5524 = vmul.f32 %v4919, %v5462
  %v5525 = vmul.f32 %v5303, %v5466
  %v5526 = vmul.f32 %v5305, %v5470
  %v5527 = vmul.f32 %v4151, %v5442
  %v5528 = vmul.f32 %v4153, %v5446
  %v5529 = vmul.f32 %v4537, %v5450
  %v5530 = vmul.f32 %v4539, %v5454
  %v5531 = vmul.f32 %v4923, %v5458
  %v5532 = vmul.f32 %v4925, %v5462
  %v5533 = vmul.f32 %v5309, %v5466
  %v5534 = vmul.f32 %v5311, %v5470
  %v5535 = vmul.f32 %v4155, %v5442
  %v5536 = vmul.f32 %v4157, %v5446
  %v5537 = vmul.f32 %v4541, %v5450
  %v5538 = vmul.f32 %v4543, %v5454
  %v5539 = vmul.f32 %v4927, %v5458
  %v5540 = vmul.f32 %v4929, %v5462
  %v5541 = vmul.f32 %v5313, %v5466
  %v5542 = vmul.f32 %v5315, %v5470
  %v5543 = vmul.f32 %v4161, %v5442
  %v5544 = vmul.f32 %v4163, %v5446
  %v5545 = vmul.f32 %v4547, %v5450
  %v5546 = vmul.f32 %v4549, %v5454
  %v5547 = vmul.f32 %v4933, %v5458
  %v5548 = vmul.f32 %v4935, %v5462
  %v5549 = vmul.f32 %v5319, %v5466
  %v5550 = vmul.f32 %v5321, %v5470
  %v5551 = vmul.f32 %v4165, %v5442
  %v5552 = vmul.f32 %v4167, %v5446
  %v5553 = vmul.f32 %v4551, %v5450
  %v5554 = vmul.f32 %v4553, %v5454
  %v5555 = vmul.f32 %v4937, %v5458
  %v5556 = vmul.f32 %v4939, %v5462
  %v5557 = vmul.f32 %v5323, %v5466
  %v5558 = vmul.f32 %v5325, %v5470
  %v5559 = vmul.f32 %v4171, %v5442
  %v5560 = vmul.f32 %v4173, %v5446
  %v5561 = vmul.f32 %v4557, %v5450
  %v5562 = vmul.f32 %v4559, %v5454
  %v5563 = vmul.f32 %v4943, %v5458
  %v5564 = vmul.f32 %v4945, %v5462
  %v5565 = vmul.f32 %v5329, %v5466
  %v5566 = vmul.f32 %v5331, %v5470
  %v5567 = vmul.f32 %v4175, %v5442
  %v5568 = vmul.f32 %v4177, %v5446
  %v5569 = vmul.f32 %v4561, %v5450
  %v5570 = vmul.f32 %v4563, %v5454
  %v5571 = vmul.f32 %v4947, %v5458
  %v5572 = vmul.f32 %v4949, %v5462
  %v5573 = vmul.f32 %v5333, %v5466
  %v5574 = vmul.f32 %v5335, %v5470
  %v5575 = vmul.f32 %v4181, %v5442
  %v5576 = vmul.f32 %v4183, %v5446
  %v5577 = vmul.f32 %v4567, %v5450
  %v5578 = vmul.f32 %v4569, %v5454
  %v5579 = vmul.f32 %v4953, %v5458
  %v5580 = vmul.f32 %v4955, %v5462
  %v5581 = vmul.f32 %v5339, %v5466
  %v5582 = vmul.f32 %v5341, %v5470
  %v5583 = vmul.f32 %v4185, %v5442
  %v5584 = vmul.f32 %v4187, %v5446
  %v5585 = vmul.f32 %v4571, %v5450
  %v5586 = vmul.f32 %v4573, %v5454
  %v5587 = vmul.f32 %v4957, %v5458
  %v5588 = vmul.f32 %v4959, %v5462
  %v5589 = vmul.f32 %v5343, %v5466
  %v5590 = vmul.f32 %v5345, %v5470
  %v5591 = vmul.f32 %v4191, %v5442
  %v5592 = vmul.f32 %v4193, %v5446
  %v5593 = vmul.f32 %v4577, %v5450
  %v5594 = vmul.f32 %v4579, %v5454
  %v5595 = vmul.f32 %v4963, %v5458
  %v5596 = vmul.f32 %v4965, %v5462
  %v5597 = vmul.f32 %v5349, %v5466
  %v5598 = vmul.f32 %v5351, %v5470
  %v5599 = vmul.f32 %v4195, %v5442
  %v5600 = vmul.f32 %v4197, %v5446
  %v5601 = vmul.f32 %v4581, %v5450
  %v5602 = vmul.f32 %v4583, %v5454
  %v5603 = vmul.f32 %v4967, %v5458
  %v5604 = vmul.f32 %v4969, %v5462
  %v5605 = vmul.f32 %v5353, %v5466
  %v5606 = vmul.f32 %v5355, %v5470
  %v5607 = vmul.f32 %v4201, %v5442
  %v5608 = vmul.f32 %v4203, %v5446
  %v5609 = vmul.f32 %v4587, %v5450
  %v5610 = vmul.f32 %v4589, %v5454
  %v5611 = vmul.f32 %v4973, %v5458
  %v5612 = vmul.f32 %v4975, %v5462
  %v5613 = vmul.f32 %v5359, %v5466
  %v5614 = vmul.f32 %v5361, %v5470
  %v5615 = vmul.f32 %v4205, %v5442
  %v5616 = vmul.f32 %v4207, %v5446
  %v5617 = vmul.f32 %v4591, %v5450
  %v5618 = vmul.f32 %v4593, %v5454
  %v5619 = vmul.f32 %v4977, %v5458
  %v5620 = vmul.f32 %v4979, %v5462
  %v5621 = vmul.f32 %v5363, %v5466
  %v5622 = vmul.f32 %v5365, %v5470
  %v5623 = vmul.f32 %v4211, %v5442
  %v5624 = vmul.f32 %v4213, %v5446
  %v5625 = vmul.f32 %v4597, %v5450
  %v5626 = vmul.f32 %v4599, %v5454
  %v5627 = vmul.f32 %v4983, %v5458
  %v5628 = vmul.f32 %v4985, %v5462
  %v5629 = vmul.f32 %v5369, %v5466
  %v5630 = vmul.f32 %v5371, %v5470
  %v5631 = vmul.f32 %v4215, %v5442
  %v5632 = vmul.f32 %v4217, %v5446
  %v5633 = vmul.f32 %v4601, %v5450
  %v5634 = vmul.f32 %v4603, %v5454
  %v5635 = vmul.f32 %v4987, %v5458
  %v5636 = vmul.f32 %v4989, %v5462
  %v5637 = vmul.f32 %v5373, %v5466
  %v5638 = vmul.f32 %v5375, %v5470
  %v5639 = vmul.f32 %v4221, %v5442
  %v5640 = vmul.f32 %v4223, %v5446
  %v5641 = vmul.f32 %v4607, %v5450
  %v5642 = vmul.f32 %v4609, %v5454
  %v5643 = vmul.f32 %v4993, %v5458
  %v5644 = vmul.f32 %v4995, %v5462
  %v5645 = vmul.f32 %v5379, %v5466
  %v5646 = vmul.f32 %v5381, %v5470
  %v5647 = vmul.f32 %v4225, %v5442
  %v5648 = vmul.f32 %v4227, %v5446
  %v5649 = vmul.f32 %v4611, %v5450
  %v5650 = vmul.f32 %v4613, %v5454
  %v5651 = vmul.f32 %v4997, %v5458
  %v5652 = vmul.f32 %v4999, %v5462
  %v5653 = vmul.f32 %v5383, %v5466
  %v5654 = vmul.f32 %v5385, %v5470
  %v5655 = vmul.f32 %v4231, %v5442
  %v5656 = vmul.f32 %v4233, %v5446
  %v5657 = vmul.f32 %v4617, %v5450
  %v5658 = vmul.f32 %v4619, %v5454
  %v5659 = vmul.f32 %v5003, %v5458
  %v5660 = vmul.f32 %v5005, %v5462
  %v5661 = vmul.f32 %v5389, %v5466
  %v5662 = vmul.f32 %v5391, %v5470
  %v5663 = vmul.f32 %v4235, %v5442
  %v5664 = vmul.f32 %v4237, %v5446
  %v5665 = vmul.f32 %v4621, %v5450
  %v5666 = vmul.f32 %v4623, %v5454
  %v5667 = vmul.f32 %v5007, %v5458
  %v5668 = vmul.f32 %v5009, %v5462
  %v5669 = vmul.f32 %v5393, %v5466
  %v5670 = vmul.f32 %v5395, %v5470
  %v5671 = vmul.f32 %v4241, %v5442
  %v5672 = vmul.f32 %v4243, %v5446
  %v5673 = vmul.f32 %v4627, %v5450
  %v5674 = vmul.f32 %v4629, %v5454
  %v5675 = vmul.f32 %v5013, %v5458
  %v5676 = vmul.f32 %v5015, %v5462
  %v5677 = vmul.f32 %v5399, %v5466
  %v5678 = vmul.f32 %v5401, %v5470
  %v5679 = vmul.f32 %v4245, %v5442
  %v5680 = vmul.f32 %v4247, %v5446
  %v5681 = vmul.f32 %v4631, %v5450
  %v5682 = vmul.f32 %v4633, %v5454
  %v5683 = vmul.f32 %v5017, %v5458
  %v5684 = vmul.f32 %v5019, %v5462
  %v5685 = vmul.f32 %v5403, %v5466
  %v5686 = vmul.f32 %v5405, %v5470
  %v5687 = vmul.f32 %v4251, %v5442
  %v5688 = vmul.f32 %v4253, %v5446
  %v5689 = vmul.f32 %v4637, %v5450
  %v5690 = vmul.f32 %v4639, %v5454
  %v5691 = vmul.f32 %v5023, %v5458
  %v5692 = vmul.f32 %v5025, %v5462
  %v5693 = vmul.f32 %v5409, %v5466
  %v5694 = vmul.f32 %v5411, %v5470
  %v5695 = vmul.f32 %v4255, %v5442
  %v5696 = vmul.f32 %v4257, %v5446
  %v5697 = vmul.f32 %v4641, %v5450
  %v5698 = vmul.f32 %v4643, %v5454
  %v5699 = vmul.f32 %v5027, %v5458
  %v5700 = vmul.f32 %v5029, %v5462
  %v5701 = vmul.f32 %v5413, %v5466
  %v5702 = vmul.f32 %v5415, %v5470
  %v5703 = vmul.f32 %v4261, %v5442
  %v5704 = vmul.f32 %v4263, %v5446
  %v5705 = vmul.f32 %v4647, %v5450
  %v5706 = vmul.f32 %v4649, %v5454
  %v5707 = vmul.f32 %v5033, %v5458
  %v5708 = vmul.f32 %v5035, %v5462
  %v5709 = vmul.f32 %v5419, %v5466
  %v5710 = vmul.f32 %v5421, %v5470
  %v5711 = vmul.f32 %v4265, %v5442
  %v5712 = vmul.f32 %v4267, %v5446
  %v5713 = vmul.f32 %v4651, %v5450
  %v5714 = vmul.f32 %v4653, %v5454
  %v5715 = vmul.f32 %v5037, %v5458
  %v5716 = vmul.f32 %v5039, %v5462
  %v5717 = vmul.f32 %v5423, %v5466
  %v5718 = vmul.f32 %v5425, %v5470
  %v5719 = vmul.f32 %v4271, %v5442
  %v5720 = vmul.f32 %v4273, %v5446
  %v5721 = vmul.f32 %v4657, %v5450
  %v5722 = vmul.f32 %v4659, %v5454
  %v5723 = vmul.f32 %v5043, %v5458
  %v5724 = vmul.f32 %v5045, %v5462
  %v5725 = vmul.f32 %v5429, %v5466
  %v5726 = vmul.f32 %v5431, %v5470
  %v5727 = vmul.f32 %v4275, %v5442
  %v5728 = vmul.f32 %v4277, %v5446
  %v5729 = vmul.f32 %v4661, %v5450
  %v5730 = vmul.f32 %v4663, %v5454
  %v5731 = vmul.f32 %v5047, %v5458
  %v5732 = vmul.f32 %v5049, %v5462
  %v5733 = vmul.f32 %v5433, %v5466
  %v5734 = vmul.f32 %v5435, %v5470
  %v5735 = vld [vmem:[%s11] sm:$0xff]
  %v5736 = vld [vmem:[%s12] sm:$0xff]
  %v5737 = vadd.f32 %v5479, %v5487
  %v5738 = vadd.f32 %v5737, %v5495
  %v5739 = vadd.f32 %v5738, %v5503
  %v5740 = vadd.f32 %v5739, %v5511
  %v5741 = vadd.f32 %v5740, %v5519
  %v5742 = vadd.f32 %v5741, %v5527
  %v5743 = vadd.f32 %v5742, %v5535
  %v5744 = vadd.f32 %v5743, %v5543
  %v5745 = vadd.f32 %v5744, %v5551
  %v5746 = vadd.f32 %v5745, %v5559
  %v5747 = vadd.f32 %v5746, %v5567
  %v5748 = vadd.f32 %v5747, %v5575
  %v5749 = vadd.f32 %v5748, %v5583
  %v5750 = vadd.f32 %v5749, %v5591
  %v5751 = vadd.f32 %v5750, %v5599
  %v5752 = vadd.f32 %v5751, %v5607
  %v5753 = vadd.f32 %v5752, %v5615
  %v5754 = vadd.f32 %v5753, %v5623
  %v5755 = vadd.f32 %v5754, %v5631
  %v5756 = vadd.f32 %v5755, %v5639
  %v5757 = vadd.f32 %v5756, %v5647
  %v5758 = vadd.f32 %v5757, %v5655
  %v5759 = vadd.f32 %v5758, %v5663
  %v5760 = vadd.f32 %v5759, %v5671
  %v5761 = vadd.f32 %v5760, %v5679
  %v5762 = vadd.f32 %v5761, %v5687
  %v5763 = vadd.f32 %v5762, %v5695
  %v5764 = vadd.f32 %v5763, %v5703
  %v5765 = vadd.f32 %v5764, %v5711
  %v5766 = vadd.f32 %v5765, %v5719
  %v5767 = vadd.f32 %v5766, %v5727
  %v5768 = vrot.slane %v5767, 4
  %v5769 = vadd.f32 %v5767, %v5768
  %v5770 = vrot.slane %v5769, 2
  %v5771 = vadd.f32 %v5769, %v5770
  %v5772 = vrot.slane %v5771, 1
  %v5773 = vadd.f32 %v5771, %v5772
  %v5774 = vadd.f32 %v5480, %v5488
  %v5775 = vadd.f32 %v5774, %v5496
  %v5776 = vadd.f32 %v5775, %v5504
  %v5777 = vadd.f32 %v5776, %v5512
  %v5778 = vadd.f32 %v5777, %v5520
  %v5779 = vadd.f32 %v5778, %v5528
  %v5780 = vadd.f32 %v5779, %v5536
  %v5781 = vadd.f32 %v5780, %v5544
  %v5782 = vadd.f32 %v5781, %v5552
  %v5783 = vadd.f32 %v5782, %v5560
  %v5784 = vadd.f32 %v5783, %v5568
  %v5785 = vadd.f32 %v5784, %v5576
  %v5786 = vadd.f32 %v5785, %v5584
  %v5787 = vadd.f32 %v5786, %v5592
  %v5788 = vadd.f32 %v5787, %v5600
  %v5789 = vadd.f32 %v5788, %v5608
  %v5790 = vadd.f32 %v5789, %v5616
  %v5791 = vadd.f32 %v5790, %v5624
  %v5792 = vadd.f32 %v5791, %v5632
  %v5793 = vadd.f32 %v5792, %v5640
  %v5794 = vadd.f32 %v5793, %v5648
  %v5795 = vadd.f32 %v5794, %v5656
  %v5796 = vadd.f32 %v5795, %v5664
  %v5797 = vadd.f32 %v5796, %v5672
  %v5798 = vadd.f32 %v5797, %v5680
  %v5799 = vadd.f32 %v5798, %v5688
  %v5800 = vadd.f32 %v5799, %v5696
  %v5801 = vadd.f32 %v5800, %v5704
  %v5802 = vadd.f32 %v5801, %v5712
  %v5803 = vadd.f32 %v5802, %v5720
  %v5804 = vadd.f32 %v5803, %v5728
  %v5805 = vrot.slane %v5804, 4
  %v5806 = vadd.f32 %v5804, %v5805
  %v5807 = vrot.slane %v5806, 2
  %v5808 = vadd.f32 %v5806, %v5807
  %v5809 = vrot.slane %v5808, 1
  %v5810 = vadd.f32 %v5808, %v5809
  %v5811 = vadd.f32 %v5481, %v5489
  %v5812 = vadd.f32 %v5811, %v5497
  %v5813 = vadd.f32 %v5812, %v5505
  %v5814 = vadd.f32 %v5813, %v5513
  %v5815 = vadd.f32 %v5814, %v5521
  %v5816 = vadd.f32 %v5815, %v5529
  %v5817 = vadd.f32 %v5816, %v5537
  %v5818 = vadd.f32 %v5817, %v5545
  %v5819 = vadd.f32 %v5818, %v5553
  %v5820 = vadd.f32 %v5819, %v5561
  %v5821 = vadd.f32 %v5820, %v5569
  %v5822 = vadd.f32 %v5821, %v5577
  %v5823 = vadd.f32 %v5822, %v5585
  %v5824 = vadd.f32 %v5823, %v5593
  %v5825 = vadd.f32 %v5824, %v5601
  %v5826 = vadd.f32 %v5825, %v5609
  %v5827 = vadd.f32 %v5826, %v5617
  %v5828 = vadd.f32 %v5827, %v5625
  %v5829 = vadd.f32 %v5828, %v5633
  %v5830 = vadd.f32 %v5829, %v5641
  %v5831 = vadd.f32 %v5830, %v5649
  %v5832 = vadd.f32 %v5831, %v5657
  %v5833 = vadd.f32 %v5832, %v5665
  %v5834 = vadd.f32 %v5833, %v5673
  %v5835 = vadd.f32 %v5834, %v5681
  %v5836 = vadd.f32 %v5835, %v5689
  %v5837 = vadd.f32 %v5836, %v5697
  %v5838 = vadd.f32 %v5837, %v5705
  %v5839 = vadd.f32 %v5838, %v5713
  %v5840 = vadd.f32 %v5839, %v5721
  %v5841 = vadd.f32 %v5840, %v5729
  %v5842 = vrot.slane %v5841, 4
  %v5843 = vadd.f32 %v5841, %v5842
  %v5844 = vrot.slane %v5843, 2
  %v5845 = vadd.f32 %v5843, %v5844
  %v5846 = vrot.slane %v5845, 1
  %v5847 = vadd.f32 %v5845, %v5846
  %v5848 = vadd.f32 %v5482, %v5490
  %v5849 = vadd.f32 %v5848, %v5498
  %v5850 = vadd.f32 %v5849, %v5506
  %v5851 = vadd.f32 %v5850, %v5514
  %v5852 = vadd.f32 %v5851, %v5522
  %v5853 = vadd.f32 %v5852, %v5530
  %v5854 = vadd.f32 %v5853, %v5538
  %v5855 = vadd.f32 %v5854, %v5546
  %v5856 = vadd.f32 %v5855, %v5554
  %v5857 = vadd.f32 %v5856, %v5562
  %v5858 = vadd.f32 %v5857, %v5570
  %v5859 = vadd.f32 %v5858, %v5578
  %v5860 = vadd.f32 %v5859, %v5586
  %v5861 = vadd.f32 %v5860, %v5594
  %v5862 = vadd.f32 %v5861, %v5602
  %v5863 = vadd.f32 %v5862, %v5610
  %v5864 = vadd.f32 %v5863, %v5618
  %v5865 = vadd.f32 %v5864, %v5626
  %v5866 = vadd.f32 %v5865, %v5634
  %v5867 = vadd.f32 %v5866, %v5642
  %v5868 = vadd.f32 %v5867, %v5650
  %v5869 = vadd.f32 %v5868, %v5658
  %v5870 = vadd.f32 %v5869, %v5666
  %v5871 = vadd.f32 %v5870, %v5674
  %v5872 = vadd.f32 %v5871, %v5682
  %v5873 = vadd.f32 %v5872, %v5690
  %v5874 = vadd.f32 %v5873, %v5698
  %v5875 = vadd.f32 %v5874, %v5706
  %v5876 = vadd.f32 %v5875, %v5714
  %v5877 = vadd.f32 %v5876, %v5722
  %v5878 = vadd.f32 %v5877, %v5730
  %v5879 = vrot.slane %v5878, 4
  %v5880 = vadd.f32 %v5878, %v5879
  %v5881 = vrot.slane %v5880, 2
  %v5882 = vadd.f32 %v5880, %v5881
  %v5883 = vrot.slane %v5882, 1
  %v5884 = vadd.f32 %v5882, %v5883
  %v5885 = vadd.f32 %v5483, %v5491
  %v5886 = vadd.f32 %v5885, %v5499
  %v5887 = vadd.f32 %v5886, %v5507
  %v5888 = vadd.f32 %v5887, %v5515
  %v5889 = vadd.f32 %v5888, %v5523
  %v5890 = vadd.f32 %v5889, %v5531
  %v5891 = vadd.f32 %v5890, %v5539
  %v5892 = vadd.f32 %v5891, %v5547
  %v5893 = vadd.f32 %v5892, %v5555
  %v5894 = vadd.f32 %v5893, %v5563
  %v5895 = vadd.f32 %v5894, %v5571
  %v5896 = vadd.f32 %v5895, %v5579
  %v5897 = vadd.f32 %v5896, %v5587
  %v5898 = vadd.f32 %v5897, %v5595
  %v5899 = vadd.f32 %v5898, %v5603
  %v5900 = vadd.f32 %v5899, %v5611
  %v5901 = vadd.f32 %v5900, %v5619
  %v5902 = vadd.f32 %v5901, %v5627
  %v5903 = vadd.f32 %v5902, %v5635
  %v5904 = vadd.f32 %v5903, %v5643
  %v5905 = vadd.f32 %v5904, %v5651
  %v5906 = vadd.f32 %v5905, %v5659
  %v5907 = vadd.f32 %v5906, %v5667
  %v5908 = vadd.f32 %v5907, %v5675
  %v5909 = vadd.f32 %v5908, %v5683
  %v5910 = vadd.f32 %v5909, %v5691
  %v5911 = vadd.f32 %v5910, %v5699
  %v5912 = vadd.f32 %v5911, %v5707
  %v5913 = vadd.f32 %v5912, %v5715
  %v5914 = vadd.f32 %v5913, %v5723
  %v5915 = vadd.f32 %v5914, %v5731
  %v5916 = vrot.slane %v5915, 4
  %v5917 = vadd.f32 %v5915, %v5916
  %v5918 = vrot.slane %v5917, 2
  %v5919 = vadd.f32 %v5917, %v5918
  %v5920 = vrot.slane %v5919, 1
  %v5921 = vadd.f32 %v5919, %v5920
  %v5922 = vadd.f32 %v5484, %v5492
  %v5923 = vadd.f32 %v5922, %v5500
  %v5924 = vadd.f32 %v5923, %v5508
  %v5925 = vadd.f32 %v5924, %v5516
  %v5926 = vadd.f32 %v5925, %v5524
  %v5927 = vadd.f32 %v5926, %v5532
  %v5928 = vadd.f32 %v5927, %v5540
  %v5929 = vadd.f32 %v5928, %v5548
  %v5930 = vadd.f32 %v5929, %v5556
  %v5931 = vadd.f32 %v5930, %v5564
  %v5932 = vadd.f32 %v5931, %v5572
  %v5933 = vadd.f32 %v5932, %v5580
  %v5934 = vadd.f32 %v5933, %v5588
  %v5935 = vadd.f32 %v5934, %v5596
  %v5936 = vadd.f32 %v5935, %v5604
  %v5937 = vadd.f32 %v5936, %v5612
  %v5938 = vadd.f32 %v5937, %v5620
  %v5939 = vadd.f32 %v5938, %v5628
  %v5940 = vadd.f32 %v5939, %v5636
  %v5941 = vadd.f32 %v5940, %v5644
  %v5942 = vadd.f32 %v5941, %v5652
  %v5943 = vadd.f32 %v5942, %v5660
  %v5944 = vadd.f32 %v5943, %v5668
  %v5945 = vadd.f32 %v5944, %v5676
  %v5946 = vadd.f32 %v5945, %v5684
  %v5947 = vadd.f32 %v5946, %v5692
  %v5948 = vadd.f32 %v5947, %v5700
  %v5949 = vadd.f32 %v5948, %v5708
  %v5950 = vadd.f32 %v5949, %v5716
  %v5951 = vadd.f32 %v5950, %v5724
  %v5952 = vadd.f32 %v5951, %v5732
  %v5953 = vrot.slane %v5952, 4
  %v5954 = vadd.f32 %v5952, %v5953
  %v5955 = vrot.slane %v5954, 2
  %v5956 = vadd.f32 %v5954, %v5955
  %v5957 = vrot.slane %v5956, 1
  %v5958 = vadd.f32 %v5956, %v5957
  %v5959 = vadd.f32 %v5485, %v5493
  %v5960 = vadd.f32 %v5959, %v5501
  %v5961 = vadd.f32 %v5960, %v5509
  %v5962 = vadd.f32 %v5961, %v5517
  %v5963 = vadd.f32 %v5962, %v5525
  %v5964 = vadd.f32 %v5963, %v5533
  %v5965 = vadd.f32 %v5964, %v5541
  %v5966 = vadd.f32 %v5965, %v5549
  %v5967 = vadd.f32 %v5966, %v5557
  %v5968 = vadd.f32 %v5967, %v5565
  %v5969 = vadd.f32 %v5968, %v5573
  %v5970 = vadd.f32 %v5969, %v5581
  %v5971 = vadd.f32 %v5970, %v5589
  %v5972 = vadd.f32 %v5971, %v5597
  %v5973 = vadd.f32 %v5972, %v5605
  %v5974 = vadd.f32 %v5973, %v5613
  %v5975 = vadd.f32 %v5974, %v5621
  %v5976 = vadd.f32 %v5975, %v5629
  %v5977 = vadd.f32 %v5976, %v5637
  %v5978 = vadd.f32 %v5977, %v5645
  %v5979 = vadd.f32 %v5978, %v5653
  %v5980 = vadd.f32 %v5979, %v5661
  %v5981 = vadd.f32 %v5980, %v5669
  %v5982 = vadd.f32 %v5981, %v5677
  %v5983 = vadd.f32 %v5982, %v5685
  %v5984 = vadd.f32 %v5983, %v5693
  %v5985 = vadd.f32 %v5984, %v5701
  %v5986 = vadd.f32 %v5985, %v5709
  %v5987 = vadd.f32 %v5986, %v5717
  %v5988 = vadd.f32 %v5987, %v5725
  %v5989 = vadd.f32 %v5988, %v5733
  %v5990 = vrot.slane %v5989, 4
  %v5991 = vadd.f32 %v5989, %v5990
  %v5992 = vrot.slane %v5991, 2
  %v5993 = vadd.f32 %v5991, %v5992
  %v5994 = vrot.slane %v5993, 1
  %v5995 = vadd.f32 %v5993, %v5994
  %v5996 = vadd.f32 %v5486, %v5494
  %v5997 = vadd.f32 %v5996, %v5502
  %v5998 = vadd.f32 %v5997, %v5510
  %v5999 = vadd.f32 %v5998, %v5518
  %v6000 = vadd.f32 %v5999, %v5526
  %v6001 = vadd.f32 %v6000, %v5534
  %v6002 = vadd.f32 %v6001, %v5542
  %v6003 = vadd.f32 %v6002, %v5550
  %v6004 = vadd.f32 %v6003, %v5558
  %v6005 = vadd.f32 %v6004, %v5566
  %v6006 = vadd.f32 %v6005, %v5574
  %v6007 = vadd.f32 %v6006, %v5582
  %v6008 = vadd.f32 %v6007, %v5590
  %v6009 = vadd.f32 %v6008, %v5598
  %v6010 = vadd.f32 %v6009, %v5606
  %v6011 = vadd.f32 %v6010, %v5614
  %v6012 = vadd.f32 %v6011, %v5622
  %v6013 = vadd.f32 %v6012, %v5630
  %v6014 = vadd.f32 %v6013, %v5638
  %v6015 = vadd.f32 %v6014, %v5646
  %v6016 = vadd.f32 %v6015, %v5654
  %v6017 = vadd.f32 %v6016, %v5662
  %v6018 = vadd.f32 %v6017, %v5670
  %v6019 = vadd.f32 %v6018, %v5678
  %v6020 = vadd.f32 %v6019, %v5686
  %v6021 = vadd.f32 %v6020, %v5694
  %v6022 = vadd.f32 %v6021, %v5702
  %v6023 = vadd.f32 %v6022, %v5710
  %v6024 = vadd.f32 %v6023, %v5718
  %v6025 = vadd.f32 %v6024, %v5726
  %v6026 = vadd.f32 %v6025, %v5734
  %v6027 = vrot.slane %v6026, 4
  %v6028 = vadd.f32 %v6026, %v6027
  %v6029 = vrot.slane %v6028, 2
  %v6030 = vadd.f32 %v6028, %v6029
  %v6031 = vrot.slane %v6030, 1
  %v6032 = vadd.f32 %v6030, %v6031
  %v6033 = vmul.f32 %v5773, %v908
  %v6034 = vmul.f32 %v5810, %v908
  %v6035 = vmul.f32 %v5847, %v908
  %v6036 = vmul.f32 %v5884, %v908
  %v6037 = vmul.f32 %v5921, %v908
  %v6038 = vmul.f32 %v5958, %v908
  %v6039 = vmul.f32 %v5995, %v908
  %v6040 = vmul.f32 %v6032, %v908
  %v6041 = vmul.f32 %v5479, %v5479
  %v6042 = vmul.f32 %v5480, %v5480
  %v6043 = vmul.f32 %v5481, %v5481
  %v6044 = vmul.f32 %v5482, %v5482
  %v6045 = vmul.f32 %v5483, %v5483
  %v6046 = vmul.f32 %v5484, %v5484
  %v6047 = vmul.f32 %v5485, %v5485
  %v6048 = vmul.f32 %v5486, %v5486
  %v6049 = vmul.f32 %v5487, %v5487
  %v6050 = vmul.f32 %v5488, %v5488
  %v6051 = vmul.f32 %v5489, %v5489
  %v6052 = vmul.f32 %v5490, %v5490
  %v6053 = vmul.f32 %v5491, %v5491
  %v6054 = vmul.f32 %v5492, %v5492
  %v6055 = vmul.f32 %v5493, %v5493
  %v6056 = vmul.f32 %v5494, %v5494
  %v6057 = vmul.f32 %v5495, %v5495
  %v6058 = vmul.f32 %v5496, %v5496
  %v6059 = vmul.f32 %v5497, %v5497
  %v6060 = vmul.f32 %v5498, %v5498
  %v6061 = vmul.f32 %v5499, %v5499
  %v6062 = vmul.f32 %v5500, %v5500
  %v6063 = vmul.f32 %v5501, %v5501
  %v6064 = vmul.f32 %v5502, %v5502
  %v6065 = vmul.f32 %v5503, %v5503
  %v6066 = vmul.f32 %v5504, %v5504
  %v6067 = vmul.f32 %v5505, %v5505
  %v6068 = vmul.f32 %v5506, %v5506
  %v6069 = vmul.f32 %v5507, %v5507
  %v6070 = vmul.f32 %v5508, %v5508
  %v6071 = vmul.f32 %v5509, %v5509
  %v6072 = vmul.f32 %v5510, %v5510
  %v6073 = vmul.f32 %v5511, %v5511
  %v6074 = vmul.f32 %v5512, %v5512
  %v6075 = vmul.f32 %v5513, %v5513
  %v6076 = vmul.f32 %v5514, %v5514
  %v6077 = vmul.f32 %v5515, %v5515
  %v6078 = vmul.f32 %v5516, %v5516
  %v6079 = vmul.f32 %v5517, %v5517
  %v6080 = vmul.f32 %v5518, %v5518
  %v6081 = vmul.f32 %v5519, %v5519
  %v6082 = vmul.f32 %v5520, %v5520
  %v6083 = vmul.f32 %v5521, %v5521
  %v6084 = vmul.f32 %v5522, %v5522
  %v6085 = vmul.f32 %v5523, %v5523
  %v6086 = vmul.f32 %v5524, %v5524
  %v6087 = vmul.f32 %v5525, %v5525
  %v6088 = vmul.f32 %v5526, %v5526
  %v6089 = vmul.f32 %v5527, %v5527
  %v6090 = vmul.f32 %v5528, %v5528
  %v6091 = vmul.f32 %v5529, %v5529
  %v6092 = vmul.f32 %v5530, %v5530
  %v6093 = vmul.f32 %v5531, %v5531
  %v6094 = vmul.f32 %v5532, %v5532
  %v6095 = vmul.f32 %v5533, %v5533
  %v6096 = vmul.f32 %v5534, %v5534
  %v6097 = vmul.f32 %v5535, %v5535
  %v6098 = vmul.f32 %v5536, %v5536
  %v6099 = vmul.f32 %v5537, %v5537
  %v6100 = vmul.f32 %v5538, %v5538
  %v6101 = vmul.f32 %v5539, %v5539
  %v6102 = vmul.f32 %v5540, %v5540
  %v6103 = vmul.f32 %v5541, %v5541
  %v6104 = vmul.f32 %v5542, %v5542
  %v6105 = vmul.f32 %v5543, %v5543
  %v6106 = vmul.f32 %v5544, %v5544
  %v6107 = vmul.f32 %v5545, %v5545
  %v6108 = vmul.f32 %v5546, %v5546
  %v6109 = vmul.f32 %v5547, %v5547
  %v6110 = vmul.f32 %v5548, %v5548
  %v6111 = vmul.f32 %v5549, %v5549
  %v6112 = vmul.f32 %v5550, %v5550
  %v6113 = vmul.f32 %v5551, %v5551
  %v6114 = vmul.f32 %v5552, %v5552
  %v6115 = vmul.f32 %v5553, %v5553
  %v6116 = vmul.f32 %v5554, %v5554
  %v6117 = vmul.f32 %v5555, %v5555
  %v6118 = vmul.f32 %v5556, %v5556
  %v6119 = vmul.f32 %v5557, %v5557
  %v6120 = vmul.f32 %v5558, %v5558
  %v6121 = vmul.f32 %v5559, %v5559
  %v6122 = vmul.f32 %v5560, %v5560
  %v6123 = vmul.f32 %v5561, %v5561
  %v6124 = vmul.f32 %v5562, %v5562
  %v6125 = vmul.f32 %v5563, %v5563
  %v6126 = vmul.f32 %v5564, %v5564
  %v6127 = vmul.f32 %v5565, %v5565
  %v6128 = vmul.f32 %v5566, %v5566
  %v6129 = vmul.f32 %v5567, %v5567
  %v6130 = vmul.f32 %v5568, %v5568
  %v6131 = vmul.f32 %v5569, %v5569
  %v6132 = vmul.f32 %v5570, %v5570
  %v6133 = vmul.f32 %v5571, %v5571
  %v6134 = vmul.f32 %v5572, %v5572
  %v6135 = vmul.f32 %v5573, %v5573
  %v6136 = vmul.f32 %v5574, %v5574
  %v6137 = vmul.f32 %v5575, %v5575
  %v6138 = vmul.f32 %v5576, %v5576
  %v6139 = vmul.f32 %v5577, %v5577
  %v6140 = vmul.f32 %v5578, %v5578
  %v6141 = vmul.f32 %v5579, %v5579
  %v6142 = vmul.f32 %v5580, %v5580
  %v6143 = vmul.f32 %v5581, %v5581
  %v6144 = vmul.f32 %v5582, %v5582
  %v6145 = vmul.f32 %v5583, %v5583
  %v6146 = vmul.f32 %v5584, %v5584
  %v6147 = vmul.f32 %v5585, %v5585
  %v6148 = vmul.f32 %v5586, %v5586
  %v6149 = vmul.f32 %v5587, %v5587
  %v6150 = vmul.f32 %v5588, %v5588
  %v6151 = vmul.f32 %v5589, %v5589
  %v6152 = vmul.f32 %v5590, %v5590
  %v6153 = vmul.f32 %v5591, %v5591
  %v6154 = vmul.f32 %v5592, %v5592
  %v6155 = vmul.f32 %v5593, %v5593
  %v6156 = vmul.f32 %v5594, %v5594
  %v6157 = vmul.f32 %v5595, %v5595
  %v6158 = vmul.f32 %v5596, %v5596
  %v6159 = vmul.f32 %v5597, %v5597
  %v6160 = vmul.f32 %v5598, %v5598
  %v6161 = vmul.f32 %v5599, %v5599
  %v6162 = vmul.f32 %v5600, %v5600
  %v6163 = vmul.f32 %v5601, %v5601
  %v6164 = vmul.f32 %v5602, %v5602
  %v6165 = vmul.f32 %v5603, %v5603
  %v6166 = vmul.f32 %v5604, %v5604
  %v6167 = vmul.f32 %v5605, %v5605
  %v6168 = vmul.f32 %v5606, %v5606
  %v6169 = vmul.f32 %v5607, %v5607
  %v6170 = vmul.f32 %v5608, %v5608
  %v6171 = vmul.f32 %v5609, %v5609
  %v6172 = vmul.f32 %v5610, %v5610
  %v6173 = vmul.f32 %v5611, %v5611
  %v6174 = vmul.f32 %v5612, %v5612
  %v6175 = vmul.f32 %v5613, %v5613
  %v6176 = vmul.f32 %v5614, %v5614
  %v6177 = vmul.f32 %v5615, %v5615
  %v6178 = vmul.f32 %v5616, %v5616
  %v6179 = vmul.f32 %v5617, %v5617
  %v6180 = vmul.f32 %v5618, %v5618
  %v6181 = vmul.f32 %v5619, %v5619
  %v6182 = vmul.f32 %v5620, %v5620
  %v6183 = vmul.f32 %v5621, %v5621
  %v6184 = vmul.f32 %v5622, %v5622
  %v6185 = vmul.f32 %v5623, %v5623
  %v6186 = vmul.f32 %v5624, %v5624
  %v6187 = vmul.f32 %v5625, %v5625
  %v6188 = vmul.f32 %v5626, %v5626
  %v6189 = vmul.f32 %v5627, %v5627
  %v6190 = vmul.f32 %v5628, %v5628
  %v6191 = vmul.f32 %v5629, %v5629
  %v6192 = vmul.f32 %v5630, %v5630
  %v6193 = vmul.f32 %v5631, %v5631
  %v6194 = vmul.f32 %v5632, %v5632
  %v6195 = vmul.f32 %v5633, %v5633
  %v6196 = vmul.f32 %v5634, %v5634
  %v6197 = vmul.f32 %v5635, %v5635
  %v6198 = vmul.f32 %v5636, %v5636
  %v6199 = vmul.f32 %v5637, %v5637
  %v6200 = vmul.f32 %v5638, %v5638
  %v6201 = vmul.f32 %v5639, %v5639
  %v6202 = vmul.f32 %v5640, %v5640
  %v6203 = vmul.f32 %v5641, %v5641
  %v6204 = vmul.f32 %v5642, %v5642
  %v6205 = vmul.f32 %v5643, %v5643
  %v6206 = vmul.f32 %v5644, %v5644
  %v6207 = vmul.f32 %v5645, %v5645
  %v6208 = vmul.f32 %v5646, %v5646
  %v6209 = vmul.f32 %v5647, %v5647
  %v6210 = vmul.f32 %v5648, %v5648
  %v6211 = vmul.f32 %v5649, %v5649
  %v6212 = vmul.f32 %v5650, %v5650
  %v6213 = vmul.f32 %v5651, %v5651
  %v6214 = vmul.f32 %v5652, %v5652
  %v6215 = vmul.f32 %v5653, %v5653
  %v6216 = vmul.f32 %v5654, %v5654
  %v6217 = vmul.f32 %v5655, %v5655
  %v6218 = vmul.f32 %v5656, %v5656
  %v6219 = vmul.f32 %v5657, %v5657
  %v6220 = vmul.f32 %v5658, %v5658
  %v6221 = vmul.f32 %v5659, %v5659
  %v6222 = vmul.f32 %v5660, %v5660
  %v6223 = vmul.f32 %v5661, %v5661
  %v6224 = vmul.f32 %v5662, %v5662
  %v6225 = vmul.f32 %v5663, %v5663
  %v6226 = vmul.f32 %v5664, %v5664
  %v6227 = vmul.f32 %v5665, %v5665
  %v6228 = vmul.f32 %v5666, %v5666
  %v6229 = vmul.f32 %v5667, %v5667
  %v6230 = vmul.f32 %v5668, %v5668
  %v6231 = vmul.f32 %v5669, %v5669
  %v6232 = vmul.f32 %v5670, %v5670
  %v6233 = vmul.f32 %v5671, %v5671
  %v6234 = vmul.f32 %v5672, %v5672
  %v6235 = vmul.f32 %v5673, %v5673
  %v6236 = vmul.f32 %v5674, %v5674
  %v6237 = vmul.f32 %v5675, %v5675
  %v6238 = vmul.f32 %v5676, %v5676
  %v6239 = vmul.f32 %v5677, %v5677
  %v6240 = vmul.f32 %v5678, %v5678
  %v6241 = vmul.f32 %v5679, %v5679
  %v6242 = vmul.f32 %v5680, %v5680
  %v6243 = vmul.f32 %v5681, %v5681
  %v6244 = vmul.f32 %v5682, %v5682
  %v6245 = vmul.f32 %v5683, %v5683
  %v6246 = vmul.f32 %v5684, %v5684
  %v6247 = vmul.f32 %v5685, %v5685
  %v6248 = vmul.f32 %v5686, %v5686
  %v6249 = vmul.f32 %v5687, %v5687
  %v6250 = vmul.f32 %v5688, %v5688
  %v6251 = vmul.f32 %v5689, %v5689
  %v6252 = vmul.f32 %v5690, %v5690
  %v6253 = vmul.f32 %v5691, %v5691
  %v6254 = vmul.f32 %v5692, %v5692
  %v6255 = vmul.f32 %v5693, %v5693
  %v6256 = vmul.f32 %v5694, %v5694
  %v6257 = vmul.f32 %v5695, %v5695
  %v6258 = vmul.f32 %v5696, %v5696
  %v6259 = vmul.f32 %v5697, %v5697
  %v6260 = vmul.f32 %v5698, %v5698
  %v6261 = vmul.f32 %v5699, %v5699
  %v6262 = vmul.f32 %v5700, %v5700
  %v6263 = vmul.f32 %v5701, %v5701
  %v6264 = vmul.f32 %v5702, %v5702
  %v6265 = vmul.f32 %v5703, %v5703
  %v6266 = vmul.f32 %v5704, %v5704
  %v6267 = vmul.f32 %v5705, %v5705
  %v6268 = vmul.f32 %v5706, %v5706
  %v6269 = vmul.f32 %v5707, %v5707
  %v6270 = vmul.f32 %v5708, %v5708
  %v6271 = vmul.f32 %v5709, %v5709
  %v6272 = vmul.f32 %v5710, %v5710
  %v6273 = vmul.f32 %v5711, %v5711
  %v6274 = vmul.f32 %v5712, %v5712
  %v6275 = vmul.f32 %v5713, %v5713
  %v6276 = vmul.f32 %v5714, %v5714
  %v6277 = vmul.f32 %v5715, %v5715
  %v6278 = vmul.f32 %v5716, %v5716
  %v6279 = vmul.f32 %v5717, %v5717
  %v6280 = vmul.f32 %v5718, %v5718
  %v6281 = vmul.f32 %v5719, %v5719
  %v6282 = vmul.f32 %v5720, %v5720
  %v6283 = vmul.f32 %v5721, %v5721
  %v6284 = vmul.f32 %v5722, %v5722
  %v6285 = vmul.f32 %v5723, %v5723
  %v6286 = vmul.f32 %v5724, %v5724
  %v6287 = vmul.f32 %v5725, %v5725
  %v6288 = vmul.f32 %v5726, %v5726
  %v6289 = vmul.f32 %v5727, %v5727
  %v6290 = vmul.f32 %v5728, %v5728
  %v6291 = vmul.f32 %v5729, %v5729
  %v6292 = vmul.f32 %v5730, %v5730
  %v6293 = vmul.f32 %v5731, %v5731
  %v6294 = vmul.f32 %v5732, %v5732
  %v6295 = vmul.f32 %v5733, %v5733
  %v6296 = vmul.f32 %v5734, %v5734
  %v6297 = vadd.f32 %v6041, %v6049
  %v6298 = vadd.f32 %v6297, %v6057
  %v6299 = vadd.f32 %v6298, %v6065
  %v6300 = vadd.f32 %v6299, %v6073
  %v6301 = vadd.f32 %v6300, %v6081
  %v6302 = vadd.f32 %v6301, %v6089
  %v6303 = vadd.f32 %v6302, %v6097
  %v6304 = vadd.f32 %v6303, %v6105
  %v6305 = vadd.f32 %v6304, %v6113
  %v6306 = vadd.f32 %v6305, %v6121
  %v6307 = vadd.f32 %v6306, %v6129
  %v6308 = vadd.f32 %v6307, %v6137
  %v6309 = vadd.f32 %v6308, %v6145
  %v6310 = vadd.f32 %v6309, %v6153
  %v6311 = vadd.f32 %v6310, %v6161
  %v6312 = vadd.f32 %v6311, %v6169
  %v6313 = vadd.f32 %v6312, %v6177
  %v6314 = vadd.f32 %v6313, %v6185
  %v6315 = vadd.f32 %v6314, %v6193
  %v6316 = vadd.f32 %v6315, %v6201
  %v6317 = vadd.f32 %v6316, %v6209
  %v6318 = vadd.f32 %v6317, %v6217
  %v6319 = vadd.f32 %v6318, %v6225
  %v6320 = vadd.f32 %v6319, %v6233
  %v6321 = vadd.f32 %v6320, %v6241
  %v6322 = vadd.f32 %v6321, %v6249
  %v6323 = vadd.f32 %v6322, %v6257
  %v6324 = vadd.f32 %v6323, %v6265
  %v6325 = vadd.f32 %v6324, %v6273
  %v6326 = vadd.f32 %v6325, %v6281
  %v6327 = vadd.f32 %v6326, %v6289
  %v6328 = vrot.slane %v6327, 4
  %v6329 = vadd.f32 %v6327, %v6328
  %v6330 = vrot.slane %v6329, 2
  %v6331 = vadd.f32 %v6329, %v6330
  %v6332 = vrot.slane %v6331, 1
  %v6333 = vadd.f32 %v6331, %v6332
  %v6334 = vadd.f32 %v6042, %v6050
  %v6335 = vadd.f32 %v6334, %v6058
  %v6336 = vadd.f32 %v6335, %v6066
  %v6337 = vadd.f32 %v6336, %v6074
  %v6338 = vadd.f32 %v6337, %v6082
  %v6339 = vadd.f32 %v6338, %v6090
  %v6340 = vadd.f32 %v6339, %v6098
  %v6341 = vadd.f32 %v6340, %v6106
  %v6342 = vadd.f32 %v6341, %v6114
  %v6343 = vadd.f32 %v6342, %v6122
  %v6344 = vadd.f32 %v6343, %v6130
  %v6345 = vadd.f32 %v6344, %v6138
  %v6346 = vadd.f32 %v6345, %v6146
  %v6347 = vadd.f32 %v6346, %v6154
  %v6348 = vadd.f32 %v6347, %v6162
  %v6349 = vadd.f32 %v6348, %v6170
  %v6350 = vadd.f32 %v6349, %v6178
  %v6351 = vadd.f32 %v6350, %v6186
  %v6352 = vadd.f32 %v6351, %v6194
  %v6353 = vadd.f32 %v6352, %v6202
  %v6354 = vadd.f32 %v6353, %v6210
  %v6355 = vadd.f32 %v6354, %v6218
  %v6356 = vadd.f32 %v6355, %v6226
  %v6357 = vadd.f32 %v6356, %v6234
  %v6358 = vadd.f32 %v6357, %v6242
  %v6359 = vadd.f32 %v6358, %v6250
  %v6360 = vadd.f32 %v6359, %v6258
  %v6361 = vadd.f32 %v6360, %v6266
  %v6362 = vadd.f32 %v6361, %v6274
  %v6363 = vadd.f32 %v6362, %v6282
  %v6364 = vadd.f32 %v6363, %v6290
  %v6365 = vrot.slane %v6364, 4
  %v6366 = vadd.f32 %v6364, %v6365
  %v6367 = vrot.slane %v6366, 2
  %v6368 = vadd.f32 %v6366, %v6367
  %v6369 = vrot.slane %v6368, 1
  %v6370 = vadd.f32 %v6368, %v6369
  %v6371 = vadd.f32 %v6043, %v6051
  %v6372 = vadd.f32 %v6371, %v6059
  %v6373 = vadd.f32 %v6372, %v6067
  %v6374 = vadd.f32 %v6373, %v6075
  %v6375 = vadd.f32 %v6374, %v6083
  %v6376 = vadd.f32 %v6375, %v6091
  %v6377 = vadd.f32 %v6376, %v6099
  %v6378 = vadd.f32 %v6377, %v6107
  %v6379 = vadd.f32 %v6378, %v6115
  %v6380 = vadd.f32 %v6379, %v6123
  %v6381 = vadd.f32 %v6380, %v6131
  %v6382 = vadd.f32 %v6381, %v6139
  %v6383 = vadd.f32 %v6382, %v6147
  %v6384 = vadd.f32 %v6383, %v6155
  %v6385 = vadd.f32 %v6384, %v6163
  %v6386 = vadd.f32 %v6385, %v6171
  %v6387 = vadd.f32 %v6386, %v6179
  %v6388 = vadd.f32 %v6387, %v6187
  %v6389 = vadd.f32 %v6388, %v6195
  %v6390 = vadd.f32 %v6389, %v6203
  %v6391 = vadd.f32 %v6390, %v6211
  %v6392 = vadd.f32 %v6391, %v6219
  %v6393 = vadd.f32 %v6392, %v6227
  %v6394 = vadd.f32 %v6393, %v6235
  %v6395 = vadd.f32 %v6394, %v6243
  %v6396 = vadd.f32 %v6395, %v6251
  %v6397 = vadd.f32 %v6396, %v6259
  %v6398 = vadd.f32 %v6397, %v6267
  %v6399 = vadd.f32 %v6398, %v6275
  %v6400 = vadd.f32 %v6399, %v6283
  %v6401 = vadd.f32 %v6400, %v6291
  %v6402 = vrot.slane %v6401, 4
  %v6403 = vadd.f32 %v6401, %v6402
  %v6404 = vrot.slane %v6403, 2
  %v6405 = vadd.f32 %v6403, %v6404
  %v6406 = vrot.slane %v6405, 1
  %v6407 = vadd.f32 %v6405, %v6406
  %v6408 = vadd.f32 %v6044, %v6052
  %v6409 = vadd.f32 %v6408, %v6060
  %v6410 = vadd.f32 %v6409, %v6068
  %v6411 = vadd.f32 %v6410, %v6076
  %v6412 = vadd.f32 %v6411, %v6084
  %v6413 = vadd.f32 %v6412, %v6092
  %v6414 = vadd.f32 %v6413, %v6100
  %v6415 = vadd.f32 %v6414, %v6108
  %v6416 = vadd.f32 %v6415, %v6116
  %v6417 = vadd.f32 %v6416, %v6124
  %v6418 = vadd.f32 %v6417, %v6132
  %v6419 = vadd.f32 %v6418, %v6140
  %v6420 = vadd.f32 %v6419, %v6148
  %v6421 = vadd.f32 %v6420, %v6156
  %v6422 = vadd.f32 %v6421, %v6164
  %v6423 = vadd.f32 %v6422, %v6172
  %v6424 = vadd.f32 %v6423, %v6180
  %v6425 = vadd.f32 %v6424, %v6188
  %v6426 = vadd.f32 %v6425, %v6196
  %v6427 = vadd.f32 %v6426, %v6204
  %v6428 = vadd.f32 %v6427, %v6212
  %v6429 = vadd.f32 %v6428, %v6220
  %v6430 = vadd.f32 %v6429, %v6228
  %v6431 = vadd.f32 %v6430, %v6236
  %v6432 = vadd.f32 %v6431, %v6244
  %v6433 = vadd.f32 %v6432, %v6252
  %v6434 = vadd.f32 %v6433, %v6260
  %v6435 = vadd.f32 %v6434, %v6268
  %v6436 = vadd.f32 %v6435, %v6276
  %v6437 = vadd.f32 %v6436, %v6284
  %v6438 = vadd.f32 %v6437, %v6292
  %v6439 = vrot.slane %v6438, 4
  %v6440 = vadd.f32 %v6438, %v6439
  %v6441 = vrot.slane %v6440, 2
  %v6442 = vadd.f32 %v6440, %v6441
  %v6443 = vrot.slane %v6442, 1
  %v6444 = vadd.f32 %v6442, %v6443
  %v6445 = vadd.f32 %v6045, %v6053
  %v6446 = vadd.f32 %v6445, %v6061
  %v6447 = vadd.f32 %v6446, %v6069
  %v6448 = vadd.f32 %v6447, %v6077
  %v6449 = vadd.f32 %v6448, %v6085
  %v6450 = vadd.f32 %v6449, %v6093
  %v6451 = vadd.f32 %v6450, %v6101
  %v6452 = vadd.f32 %v6451, %v6109
  %v6453 = vadd.f32 %v6452, %v6117
  %v6454 = vadd.f32 %v6453, %v6125
  %v6455 = vadd.f32 %v6454, %v6133
  %v6456 = vadd.f32 %v6455, %v6141
  %v6457 = vadd.f32 %v6456, %v6149
  %v6458 = vadd.f32 %v6457, %v6157
  %v6459 = vadd.f32 %v6458, %v6165
  %v6460 = vadd.f32 %v6459, %v6173
  %v6461 = vadd.f32 %v6460, %v6181
  %v6462 = vadd.f32 %v6461, %v6189
  %v6463 = vadd.f32 %v6462, %v6197
  %v6464 = vadd.f32 %v6463, %v6205
  %v6465 = vadd.f32 %v6464, %v6213
  %v6466 = vadd.f32 %v6465, %v6221
  %v6467 = vadd.f32 %v6466, %v6229
  %v6468 = vadd.f32 %v6467, %v6237
  %v6469 = vadd.f32 %v6468, %v6245
  %v6470 = vadd.f32 %v6469, %v6253
  %v6471 = vadd.f32 %v6470, %v6261
  %v6472 = vadd.f32 %v6471, %v6269
  %v6473 = vadd.f32 %v6472, %v6277
  %v6474 = vadd.f32 %v6473, %v6285
  %v6475 = vadd.f32 %v6474, %v6293
  %v6476 = vrot.slane %v6475, 4
  %v6477 = vadd.f32 %v6475, %v6476
  %v6478 = vrot.slane %v6477, 2
  %v6479 = vadd.f32 %v6477, %v6478
  %v6480 = vrot.slane %v6479, 1
  %v6481 = vadd.f32 %v6479, %v6480
  %v6482 = vadd.f32 %v6046, %v6054
  %v6483 = vadd.f32 %v6482, %v6062
  %v6484 = vadd.f32 %v6483, %v6070
  %v6485 = vadd.f32 %v6484, %v6078
  %v6486 = vadd.f32 %v6485, %v6086
  %v6487 = vadd.f32 %v6486, %v6094
  %v6488 = vadd.f32 %v6487, %v6102
  %v6489 = vadd.f32 %v6488, %v6110
  %v6490 = vadd.f32 %v6489, %v6118
  %v6491 = vadd.f32 %v6490, %v6126
  %v6492 = vadd.f32 %v6491, %v6134
  %v6493 = vadd.f32 %v6492, %v6142
  %v6494 = vadd.f32 %v6493, %v6150
  %v6495 = vadd.f32 %v6494, %v6158
  %v6496 = vadd.f32 %v6495, %v6166
  %v6497 = vadd.f32 %v6496, %v6174
  %v6498 = vadd.f32 %v6497, %v6182
  %v6499 = vadd.f32 %v6498, %v6190
  %v6500 = vadd.f32 %v6499, %v6198
  %v6501 = vadd.f32 %v6500, %v6206
  %v6502 = vadd.f32 %v6501, %v6214
  %v6503 = vadd.f32 %v6502, %v6222
  %v6504 = vadd.f32 %v6503, %v6230
  %v6505 = vadd.f32 %v6504, %v6238
  %v6506 = vadd.f32 %v6505, %v6246
  %v6507 = vadd.f32 %v6506, %v6254
  %v6508 = vadd.f32 %v6507, %v6262
  %v6509 = vadd.f32 %v6508, %v6270
  %v6510 = vadd.f32 %v6509, %v6278
  %v6511 = vadd.f32 %v6510, %v6286
  %v6512 = vadd.f32 %v6511, %v6294
  %v6513 = vrot.slane %v6512, 4
  %v6514 = vadd.f32 %v6512, %v6513
  %v6515 = vrot.slane %v6514, 2
  %v6516 = vadd.f32 %v6514, %v6515
  %v6517 = vrot.slane %v6516, 1
  %v6518 = vadd.f32 %v6516, %v6517
  %v6519 = vadd.f32 %v6047, %v6055
  %v6520 = vadd.f32 %v6519, %v6063
  %v6521 = vadd.f32 %v6520, %v6071
  %v6522 = vadd.f32 %v6521, %v6079
  %v6523 = vadd.f32 %v6522, %v6087
  %v6524 = vadd.f32 %v6523, %v6095
  %v6525 = vadd.f32 %v6524, %v6103
  %v6526 = vadd.f32 %v6525, %v6111
  %v6527 = vadd.f32 %v6526, %v6119
  %v6528 = vadd.f32 %v6527, %v6127
  %v6529 = vadd.f32 %v6528, %v6135
  %v6530 = vadd.f32 %v6529, %v6143
  %v6531 = vadd.f32 %v6530, %v6151
  %v6532 = vadd.f32 %v6531, %v6159
  %v6533 = vadd.f32 %v6532, %v6167
  %v6534 = vadd.f32 %v6533, %v6175
  %v6535 = vadd.f32 %v6534, %v6183
  %v6536 = vadd.f32 %v6535, %v6191
  %v6537 = vadd.f32 %v6536, %v6199
  %v6538 = vadd.f32 %v6537, %v6207
  %v6539 = vadd.f32 %v6538, %v6215
  %v6540 = vadd.f32 %v6539, %v6223
  %v6541 = vadd.f32 %v6540, %v6231
  %v6542 = vadd.f32 %v6541, %v6239
  %v6543 = vadd.f32 %v6542, %v6247
  %v6544 = vadd.f32 %v6543, %v6255
  %v6545 = vadd.f32 %v6544, %v6263
  %v6546 = vadd.f32 %v6545, %v6271
  %v6547 = vadd.f32 %v6546, %v6279
  %v6548 = vadd.f32 %v6547, %v6287
  %v6549 = vadd.f32 %v6548, %v6295
  %v6550 = vrot.slane %v6549, 4
  %v6551 = vadd.f32 %v6549, %v6550
  %v6552 = vrot.slane %v6551, 2
  %v6553 = vadd.f32 %v6551, %v6552
  %v6554 = vrot.slane %v6553, 1
  %v6555 = vadd.f32 %v6553, %v6554
  %v6556 = vadd.f32 %v6048, %v6056
  %v6557 = vadd.f32 %v6556, %v6064
  %v6558 = vadd.f32 %v6557, %v6072
  %v6559 = vadd.f32 %v6558, %v6080
  %v6560 = vadd.f32 %v6559, %v6088
  %v6561 = vadd.f32 %v6560, %v6096
  %v6562 = vadd.f32 %v6561, %v6104
  %v6563 = vadd.f32 %v6562, %v6112
  %v6564 = vadd.f32 %v6563, %v6120
  %v6565 = vadd.f32 %v6564, %v6128
  %v6566 = vadd.f32 %v6565, %v6136
  %v6567 = vadd.f32 %v6566, %v6144
  %v6568 = vadd.f32 %v6567, %v6152
  %v6569 = vadd.f32 %v6568, %v6160
  %v6570 = vadd.f32 %v6569, %v6168
  %v6571 = vadd.f32 %v6570, %v6176
  %v6572 = vadd.f32 %v6571, %v6184
  %v6573 = vadd.f32 %v6572, %v6192
  %v6574 = vadd.f32 %v6573, %v6200
  %v6575 = vadd.f32 %v6574, %v6208
  %v6576 = vadd.f32 %v6575, %v6216
  %v6577 = vadd.f32 %v6576, %v6224
  %v6578 = vadd.f32 %v6577, %v6232
  %v6579 = vadd.f32 %v6578, %v6240
  %v6580 = vadd.f32 %v6579, %v6248
  %v6581 = vadd.f32 %v6580, %v6256
  %v6582 = vadd.f32 %v6581, %v6264
  %v6583 = vadd.f32 %v6582, %v6272
  %v6584 = vadd.f32 %v6583, %v6280
  %v6585 = vadd.f32 %v6584, %v6288
  %v6586 = vadd.f32 %v6585, %v6296
  %v6587 = vrot.slane %v6586, 4
  %v6588 = vadd.f32 %v6586, %v6587
  %v6589 = vrot.slane %v6588, 2
  %v6590 = vadd.f32 %v6588, %v6589
  %v6591 = vrot.slane %v6590, 1
  %v6592 = vadd.f32 %v6590, %v6591
  %v6593 = vmul.f32 %v6333, %v908
  %v6594 = vmul.f32 %v6370, %v908
  %v6595 = vmul.f32 %v6407, %v908
  %v6596 = vmul.f32 %v6444, %v908
  %v6597 = vmul.f32 %v6481, %v908
  %v6598 = vmul.f32 %v6518, %v908
  %v6599 = vmul.f32 %v6555, %v908
  %v6600 = vmul.f32 %v6592, %v908
  %v6601 = vmul.f32 %v6033, %v6033
  %v6602 = vmul.f32 %v6034, %v6034
  %v6603 = vmul.f32 %v6035, %v6035
  %v6604 = vmul.f32 %v6036, %v6036
  %v6605 = vmul.f32 %v6037, %v6037
  %v6606 = vmul.f32 %v6038, %v6038
  %v6607 = vmul.f32 %v6039, %v6039
  %v6608 = vmul.f32 %v6040, %v6040
  %v6609 = vsub.f32 %v6593, %v6601
  %v6610 = vsub.f32 %v6594, %v6602
  %v6611 = vsub.f32 %v6595, %v6603
  %v6612 = vsub.f32 %v6596, %v6604
  %v6613 = vsub.f32 %v6597, %v6605
  %v6614 = vsub.f32 %v6598, %v6606
  %v6615 = vsub.f32 %v6599, %v6607
  %v6616 = vsub.f32 %v6600, %v6608
  %v6617 = vmax.f32 %v6609, 0.0
  %v6618 = vmax.f32 %v6610, 0.0
  %v6619 = vmax.f32 %v6611, 0.0
  %v6620 = vmax.f32 %v6612, 0.0
  %v6621 = vmax.f32 %v6613, 0.0
  %v6622 = vmax.f32 %v6614, 0.0
  %v6623 = vmax.f32 %v6615, 0.0
  %v6624 = vmax.f32 %v6616, 0.0
  %v6625 = vadd.f32 %v6617, 1e-05
  %v6626 = vadd.f32 %v6618, 1e-05
  %v6627 = vadd.f32 %v6619, 1e-05
  %v6628 = vadd.f32 %v6620, 1e-05
  %v6629 = vadd.f32 %v6621, 1e-05
  %v6630 = vadd.f32 %v6622, 1e-05
  %v6631 = vadd.f32 %v6623, 1e-05
  %v6632 = vadd.f32 %v6624, 1e-05
  %v6633 = vrsqrt.pop %v6625
  %v6634 = vrsqrt.pop %v6626
  %v6635 = vrsqrt.pop %v6627
  %v6636 = vrsqrt.pop %v6628
  %v6637 = vrsqrt.pop %v6629
  %v6638 = vrsqrt.pop %v6630
  %v6639 = vrsqrt.pop %v6631
  %v6640 = vrsqrt.pop %v6632
  %v6649 = vcombine.low %v6633, %v6634
  %v6650 = vcombine.low %v6635, %v6636
  %v6651 = vcombine.low %v6637, %v6638
  %v6652 = vcombine.low %v6639, %v6640
  %v6654 = vunpack.c.l.s4 1966171168
  %v6655 = vunpack.c.0.s8 %v6654
  %v6656 = vlaneseq
  %v6657 = vshrl.u32 %v6656, 7
  %v6658 = vsub.s32 %v6655, %v6657
  %v6659 = vrot.slane %v6649, %v6658
  %v6661 = vunpack.c.l.s4 1966171168
  %v6662 = vunpack.c.0.s8 %v6661
  %v6663 = vlaneseq
  %v6664 = vshrl.u32 %v6663, 7
  %v6665 = vsub.s32 %v6662, %v6664
  %v6666 = vrot.slane %v6650, %v6665
  %v6668 = vunpack.c.l.s4 1966171168
  %v6669 = vunpack.c.0.s8 %v6668
  %v6670 = vlaneseq
  %v6671 = vshrl.u32 %v6670, 7
  %v6672 = vsub.s32 %v6669, %v6671
  %v6673 = vrot.slane %v6651, %v6672
  %v6675 = vunpack.c.l.s4 1966171168
  %v6676 = vunpack.c.0.s8 %v6675
  %v6677 = vlaneseq
  %v6678 = vshrl.u32 %v6677, 7
  %v6679 = vsub.s32 %v6676, %v6678
  %v6680 = vrot.slane %v6652, %v6679
  %v6681 = vcombine.low %v6659, %v6666
  %v6682 = vcombine.low %v6673, %v6680
  %v6684 = vunpack.c.l.s4 1966171168
  %v6685 = vunpack.c.0.s8 %v6684
  %v6686 = vlaneseq
  %v6687 = vshrl.u32 %v6686, 7
  %v6688 = vsub.s32 %v6685, %v6687
  %v6689 = vrot.slane %v6681, %v6688
  %v6691 = vunpack.c.l.s4 1966171168
  %v6692 = vunpack.c.0.s8 %v6691
  %v6693 = vlaneseq
  %v6694 = vshrl.u32 %v6693, 7
  %v6695 = vsub.s32 %v6692, %v6694
  %v6696 = vrot.slane %v6682, %v6695
  %v6697 = vcombine.low %v6689, %v6696
  %v6699 = vmul.f32 %v5735, %v6697
  %v6701 = vlaneseq
  %v6702 = vshrl.u32 %v6701, 7
  %v6703 = vsub.s32 0, %v6702
  %v6704 = vrot.slane %v6699, %v6703
  %v6705 = vlaneseq
  %v6706 = vshrl.u32 %v6705, 7
  %v6707 = vsub.s32 1, %v6706
  %v6708 = vrot.slane %v6699, %v6707
  %v6709 = vlaneseq
  %v6710 = vshrl.u32 %v6709, 7
  %v6711 = vsub.s32 2, %v6710
  %v6712 = vrot.slane %v6699, %v6711
  %v6713 = vlaneseq
  %v6714 = vshrl.u32 %v6713, 7
  %v6715 = vsub.s32 3, %v6714
  %v6716 = vrot.slane %v6699, %v6715
  %v6717 = vlaneseq
  %v6718 = vshrl.u32 %v6717, 7
  %v6719 = vsub.s32 4, %v6718
  %v6720 = vrot.slane %v6699, %v6719
  %v6721 = vlaneseq
  %v6722 = vshrl.u32 %v6721, 7
  %v6723 = vsub.s32 5, %v6722
  %v6724 = vrot.slane %v6699, %v6723
  %v6725 = vlaneseq
  %v6726 = vshrl.u32 %v6725, 7
  %v6727 = vsub.s32 6, %v6726
  %v6728 = vrot.slane %v6699, %v6727
  %v6729 = vlaneseq
  %v6730 = vshrl.u32 %v6729, 7
  %v6731 = vsub.s32 7, %v6730
  %v6732 = vrot.slane %v6699, %v6731
  %v6741 = vmul.f32 %v6033, %v6704
  %v6742 = vmul.f32 %v6034, %v6708
  %v6743 = vmul.f32 %v6035, %v6712
  %v6744 = vmul.f32 %v6036, %v6716
  %v6745 = vmul.f32 %v6037, %v6720
  %v6746 = vmul.f32 %v6038, %v6724
  %v6747 = vmul.f32 %v6039, %v6728
  %v6748 = vmul.f32 %v6040, %v6732
  %v6757 = vcombine.low %v6741, %v6742
  %v6758 = vcombine.low %v6743, %v6744
  %v6759 = vcombine.low %v6745, %v6746
  %v6760 = vcombine.low %v6747, %v6748
  %v6762 = vunpack.c.l.s4 1966171168
  %v6763 = vunpack.c.0.s8 %v6762
  %v6764 = vlaneseq
  %v6765 = vshrl.u32 %v6764, 7
  %v6766 = vsub.s32 %v6763, %v6765
  %v6767 = vrot.slane %v6757, %v6766
  %v6769 = vunpack.c.l.s4 1966171168
  %v6770 = vunpack.c.0.s8 %v6769
  %v6771 = vlaneseq
  %v6772 = vshrl.u32 %v6771, 7
  %v6773 = vsub.s32 %v6770, %v6772
  %v6774 = vrot.slane %v6758, %v6773
  %v6776 = vunpack.c.l.s4 1966171168
  %v6777 = vunpack.c.0.s8 %v6776
  %v6778 = vlaneseq
  %v6779 = vshrl.u32 %v6778, 7
  %v6780 = vsub.s32 %v6777, %v6779
  %v6781 = vrot.slane %v6759, %v6780
  %v6783 = vunpack.c.l.s4 1966171168
  %v6784 = vunpack.c.0.s8 %v6783
  %v6785 = vlaneseq
  %v6786 = vshrl.u32 %v6785, 7
  %v6787 = vsub.s32 %v6784, %v6786
  %v6788 = vrot.slane %v6760, %v6787
  %v6789 = vcombine.low %v6767, %v6774
  %v6790 = vcombine.low %v6781, %v6788
  %v6792 = vunpack.c.l.s4 1966171168
  %v6793 = vunpack.c.0.s8 %v6792
  %v6794 = vlaneseq
  %v6795 = vshrl.u32 %v6794, 7
  %v6796 = vsub.s32 %v6793, %v6795
  %v6797 = vrot.slane %v6789, %v6796
  %v6799 = vunpack.c.l.s4 1966171168
  %v6800 = vunpack.c.0.s8 %v6799
  %v6801 = vlaneseq
  %v6802 = vshrl.u32 %v6801, 7
  %v6803 = vsub.s32 %v6800, %v6802
  %v6804 = vrot.slane %v6790, %v6803
  %v6805 = vcombine.low %v6797, %v6804
  %v6807 = vsub.f32 %v5736, %v6805
  %v6808 = vmul.f32 %v5479, %v6704
  %v6809 = vmul.f32 %v5480, %v6708
  %v6810 = vmul.f32 %v5481, %v6712
  %v6811 = vmul.f32 %v5482, %v6716
  %v6812 = vmul.f32 %v5483, %v6720
  %v6813 = vmul.f32 %v5484, %v6724
  %v6814 = vmul.f32 %v5485, %v6728
  %v6815 = vmul.f32 %v5486, %v6732
  %v6816 = vmul.f32 %v5487, %v6704
  %v6817 = vmul.f32 %v5488, %v6708
  %v6818 = vmul.f32 %v5489, %v6712
  %v6819 = vmul.f32 %v5490, %v6716
  %v6820 = vmul.f32 %v5491, %v6720
  %v6821 = vmul.f32 %v5492, %v6724
  %v6822 = vmul.f32 %v5493, %v6728
  %v6823 = vmul.f32 %v5494, %v6732
  %v6824 = vmul.f32 %v5495, %v6704
  %v6825 = vmul.f32 %v5496, %v6708
  %v6826 = vmul.f32 %v5497, %v6712
  %v6827 = vmul.f32 %v5498, %v6716
  %v6828 = vmul.f32 %v5499, %v6720
  %v6829 = vmul.f32 %v5500, %v6724
  %v6830 = vmul.f32 %v5501, %v6728
  %v6831 = vmul.f32 %v5502, %v6732
  %v6832 = vmul.f32 %v5503, %v6704
  %v6833 = vmul.f32 %v5504, %v6708
  %v6834 = vmul.f32 %v5505, %v6712
  %v6835 = vmul.f32 %v5506, %v6716
  %v6836 = vmul.f32 %v5507, %v6720
  %v6837 = vmul.f32 %v5508, %v6724
  %v6838 = vmul.f32 %v5509, %v6728
  %v6839 = vmul.f32 %v5510, %v6732
  %v6840 = vmul.f32 %v5511, %v6704
  %v6841 = vmul.f32 %v5512, %v6708
  %v6842 = vmul.f32 %v5513, %v6712
  %v6843 = vmul.f32 %v5514, %v6716
  %v6844 = vmul.f32 %v5515, %v6720
  %v6845 = vmul.f32 %v5516, %v6724
  %v6846 = vmul.f32 %v5517, %v6728
  %v6847 = vmul.f32 %v5518, %v6732
  %v6848 = vmul.f32 %v5519, %v6704
  %v6849 = vmul.f32 %v5520, %v6708
  %v6850 = vmul.f32 %v5521, %v6712
  %v6851 = vmul.f32 %v5522, %v6716
  %v6852 = vmul.f32 %v5523, %v6720
  %v6853 = vmul.f32 %v5524, %v6724
  %v6854 = vmul.f32 %v5525, %v6728
  %v6855 = vmul.f32 %v5526, %v6732
  %v6856 = vmul.f32 %v5527, %v6704
  %v6857 = vmul.f32 %v5528, %v6708
  %v6858 = vmul.f32 %v5529, %v6712
  %v6859 = vmul.f32 %v5530, %v6716
  %v6860 = vmul.f32 %v5531, %v6720
  %v6861 = vmul.f32 %v5532, %v6724
  %v6862 = vmul.f32 %v5533, %v6728
  %v6863 = vmul.f32 %v5534, %v6732
  %v6864 = vmul.f32 %v5535, %v6704
  %v6865 = vmul.f32 %v5536, %v6708
  %v6866 = vmul.f32 %v5537, %v6712
  %v6867 = vmul.f32 %v5538, %v6716
  %v6868 = vmul.f32 %v5539, %v6720
  %v6869 = vmul.f32 %v5540, %v6724
  %v6870 = vmul.f32 %v5541, %v6728
  %v6871 = vmul.f32 %v5542, %v6732
  %v6872 = vmul.f32 %v5543, %v6704
  %v6873 = vmul.f32 %v5544, %v6708
  %v6874 = vmul.f32 %v5545, %v6712
  %v6875 = vmul.f32 %v5546, %v6716
  %v6876 = vmul.f32 %v5547, %v6720
  %v6877 = vmul.f32 %v5548, %v6724
  %v6878 = vmul.f32 %v5549, %v6728
  %v6879 = vmul.f32 %v5550, %v6732
  %v6880 = vmul.f32 %v5551, %v6704
  %v6881 = vmul.f32 %v5552, %v6708
  %v6882 = vmul.f32 %v5553, %v6712
  %v6883 = vmul.f32 %v5554, %v6716
  %v6884 = vmul.f32 %v5555, %v6720
  %v6885 = vmul.f32 %v5556, %v6724
  %v6886 = vmul.f32 %v5557, %v6728
  %v6887 = vmul.f32 %v5558, %v6732
  %v6888 = vmul.f32 %v5559, %v6704
  %v6889 = vmul.f32 %v5560, %v6708
  %v6890 = vmul.f32 %v5561, %v6712
  %v6891 = vmul.f32 %v5562, %v6716
  %v6892 = vmul.f32 %v5563, %v6720
  %v6893 = vmul.f32 %v5564, %v6724
  %v6894 = vmul.f32 %v5565, %v6728
  %v6895 = vmul.f32 %v5566, %v6732
  %v6896 = vmul.f32 %v5567, %v6704
  %v6897 = vmul.f32 %v5568, %v6708
  %v6898 = vmul.f32 %v5569, %v6712
  %v6899 = vmul.f32 %v5570, %v6716
  %v6900 = vmul.f32 %v5571, %v6720
  %v6901 = vmul.f32 %v5572, %v6724
  %v6902 = vmul.f32 %v5573, %v6728
  %v6903 = vmul.f32 %v5574, %v6732
  %v6904 = vmul.f32 %v5575, %v6704
  %v6905 = vmul.f32 %v5576, %v6708
  %v6906 = vmul.f32 %v5577, %v6712
  %v6907 = vmul.f32 %v5578, %v6716
  %v6908 = vmul.f32 %v5579, %v6720
  %v6909 = vmul.f32 %v5580, %v6724
  %v6910 = vmul.f32 %v5581, %v6728
  %v6911 = vmul.f32 %v5582, %v6732
  %v6912 = vmul.f32 %v5583, %v6704
  %v6913 = vmul.f32 %v5584, %v6708
  %v6914 = vmul.f32 %v5585, %v6712
  %v6915 = vmul.f32 %v5586, %v6716
  %v6916 = vmul.f32 %v5587, %v6720
  %v6917 = vmul.f32 %v5588, %v6724
  %v6918 = vmul.f32 %v5589, %v6728
  %v6919 = vmul.f32 %v5590, %v6732
  %v6920 = vmul.f32 %v5591, %v6704
  %v6921 = vmul.f32 %v5592, %v6708
  %v6922 = vmul.f32 %v5593, %v6712
  %v6923 = vmul.f32 %v5594, %v6716
  %v6924 = vmul.f32 %v5595, %v6720
  %v6925 = vmul.f32 %v5596, %v6724
  %v6926 = vmul.f32 %v5597, %v6728
  %v6927 = vmul.f32 %v5598, %v6732
  %v6928 = vmul.f32 %v5599, %v6704
  %v6929 = vmul.f32 %v5600, %v6708
  %v6930 = vmul.f32 %v5601, %v6712
  %v6931 = vmul.f32 %v5602, %v6716
  %v6932 = vmul.f32 %v5603, %v6720
  %v6933 = vmul.f32 %v5604, %v6724
  %v6934 = vmul.f32 %v5605, %v6728
  %v6935 = vmul.f32 %v5606, %v6732
  %v6936 = vmul.f32 %v5607, %v6704
  %v6937 = vmul.f32 %v5608, %v6708
  %v6938 = vmul.f32 %v5609, %v6712
  %v6939 = vmul.f32 %v5610, %v6716
  %v6940 = vmul.f32 %v5611, %v6720
  %v6941 = vmul.f32 %v5612, %v6724
  %v6942 = vmul.f32 %v5613, %v6728
  %v6943 = vmul.f32 %v5614, %v6732
  %v6944 = vmul.f32 %v5615, %v6704
  %v6945 = vmul.f32 %v5616, %v6708
  %v6946 = vmul.f32 %v5617, %v6712
  %v6947 = vmul.f32 %v5618, %v6716
  %v6948 = vmul.f32 %v5619, %v6720
  %v6949 = vmul.f32 %v5620, %v6724
  %v6950 = vmul.f32 %v5621, %v6728
  %v6951 = vmul.f32 %v5622, %v6732
  %v6952 = vmul.f32 %v5623, %v6704
  %v6953 = vmul.f32 %v5624, %v6708
  %v6954 = vmul.f32 %v5625, %v6712
  %v6955 = vmul.f32 %v5626, %v6716
  %v6956 = vmul.f32 %v5627, %v6720
  %v6957 = vmul.f32 %v5628, %v6724
  %v6958 = vmul.f32 %v5629, %v6728
  %v6959 = vmul.f32 %v5630, %v6732
  %v6960 = vmul.f32 %v5631, %v6704
  %v6961 = vmul.f32 %v5632, %v6708
  %v6962 = vmul.f32 %v5633, %v6712
  %v6963 = vmul.f32 %v5634, %v6716
  %v6964 = vmul.f32 %v5635, %v6720
  %v6965 = vmul.f32 %v5636, %v6724
  %v6966 = vmul.f32 %v5637, %v6728
  %v6967 = vmul.f32 %v5638, %v6732
  %v6968 = vmul.f32 %v5639, %v6704
  %v6969 = vmul.f32 %v5640, %v6708
  %v6970 = vmul.f32 %v5641, %v6712
  %v6971 = vmul.f32 %v5642, %v6716
  %v6972 = vmul.f32 %v5643, %v6720
  %v6973 = vmul.f32 %v5644, %v6724
  %v6974 = vmul.f32 %v5645, %v6728
  %v6975 = vmul.f32 %v5646, %v6732
  %v6976 = vmul.f32 %v5647, %v6704
  %v6977 = vmul.f32 %v5648, %v6708
  %v6978 = vmul.f32 %v5649, %v6712
  %v6979 = vmul.f32 %v5650, %v6716
  %v6980 = vmul.f32 %v5651, %v6720
  %v6981 = vmul.f32 %v5652, %v6724
  %v6982 = vmul.f32 %v5653, %v6728
  %v6983 = vmul.f32 %v5654, %v6732
  %v6984 = vmul.f32 %v5655, %v6704
  %v6985 = vmul.f32 %v5656, %v6708
  %v6986 = vmul.f32 %v5657, %v6712
  %v6987 = vmul.f32 %v5658, %v6716
  %v6988 = vmul.f32 %v5659, %v6720
  %v6989 = vmul.f32 %v5660, %v6724
  %v6990 = vmul.f32 %v5661, %v6728
  %v6991 = vmul.f32 %v5662, %v6732
  %v6992 = vmul.f32 %v5663, %v6704
  %v6993 = vmul.f32 %v5664, %v6708
  %v6994 = vmul.f32 %v5665, %v6712
  %v6995 = vmul.f32 %v5666, %v6716
  %v6996 = vmul.f32 %v5667, %v6720
  %v6997 = vmul.f32 %v5668, %v6724
  %v6998 = vmul.f32 %v5669, %v6728
  %v6999 = vmul.f32 %v5670, %v6732
  %v7000 = vmul.f32 %v5671, %v6704
  %v7001 = vmul.f32 %v5672, %v6708
  %v7002 = vmul.f32 %v5673, %v6712
  %v7003 = vmul.f32 %v5674, %v6716
  %v7004 = vmul.f32 %v5675, %v6720
  %v7005 = vmul.f32 %v5676, %v6724
  %v7006 = vmul.f32 %v5677, %v6728
  %v7007 = vmul.f32 %v5678, %v6732
  %v7008 = vmul.f32 %v5679, %v6704
  %v7009 = vmul.f32 %v5680, %v6708
  %v7010 = vmul.f32 %v5681, %v6712
  %v7011 = vmul.f32 %v5682, %v6716
  %v7012 = vmul.f32 %v5683, %v6720
  %v7013 = vmul.f32 %v5684, %v6724
  %v7014 = vmul.f32 %v5685, %v6728
  %v7015 = vmul.f32 %v5686, %v6732
  %v7016 = vmul.f32 %v5687, %v6704
  %v7017 = vmul.f32 %v5688, %v6708
  %v7018 = vmul.f32 %v5689, %v6712
  %v7019 = vmul.f32 %v5690, %v6716
  %v7020 = vmul.f32 %v5691, %v6720
  %v7021 = vmul.f32 %v5692, %v6724
  %v7022 = vmul.f32 %v5693, %v6728
  %v7023 = vmul.f32 %v5694, %v6732
  %v7024 = vmul.f32 %v5695, %v6704
  %v7025 = vmul.f32 %v5696, %v6708
  %v7026 = vmul.f32 %v5697, %v6712
  %v7027 = vmul.f32 %v5698, %v6716
  %v7028 = vmul.f32 %v5699, %v6720
  %v7029 = vmul.f32 %v5700, %v6724
  %v7030 = vmul.f32 %v5701, %v6728
  %v7031 = vmul.f32 %v5702, %v6732
  %v7032 = vmul.f32 %v5703, %v6704
  %v7033 = vmul.f32 %v5704, %v6708
  %v7034 = vmul.f32 %v5705, %v6712
  %v7035 = vmul.f32 %v5706, %v6716
  %v7036 = vmul.f32 %v5707, %v6720
  %v7037 = vmul.f32 %v5708, %v6724
  %v7038 = vmul.f32 %v5709, %v6728
  %v7039 = vmul.f32 %v5710, %v6732
  %v7040 = vmul.f32 %v5711, %v6704
  %v7041 = vmul.f32 %v5712, %v6708
  %v7042 = vmul.f32 %v5713, %v6712
  %v7043 = vmul.f32 %v5714, %v6716
  %v7044 = vmul.f32 %v5715, %v6720
  %v7045 = vmul.f32 %v5716, %v6724
  %v7046 = vmul.f32 %v5717, %v6728
  %v7047 = vmul.f32 %v5718, %v6732
  %v7048 = vmul.f32 %v5719, %v6704
  %v7049 = vmul.f32 %v5720, %v6708
  %v7050 = vmul.f32 %v5721, %v6712
  %v7051 = vmul.f32 %v5722, %v6716
  %v7052 = vmul.f32 %v5723, %v6720
  %v7053 = vmul.f32 %v5724, %v6724
  %v7054 = vmul.f32 %v5725, %v6728
  %v7055 = vmul.f32 %v5726, %v6732
  %v7056 = vmul.f32 %v5727, %v6704
  %v7057 = vmul.f32 %v5728, %v6708
  %v7058 = vmul.f32 %v5729, %v6712
  %v7059 = vmul.f32 %v5730, %v6716
  %v7060 = vmul.f32 %v5731, %v6720
  %v7061 = vmul.f32 %v5732, %v6724
  %v7062 = vmul.f32 %v5733, %v6728
  %v7063 = vmul.f32 %v5734, %v6732
  %v7065 = vlaneseq
  %v7066 = vshrl.u32 %v7065, 7
  %v7067 = vsub.s32 0, %v7066
  %v7068 = vrot.slane %v6807, %v7067
  %v7069 = vlaneseq
  %v7070 = vshrl.u32 %v7069, 7
  %v7071 = vsub.s32 1, %v7070
  %v7072 = vrot.slane %v6807, %v7071
  %v7073 = vlaneseq
  %v7074 = vshrl.u32 %v7073, 7
  %v7075 = vsub.s32 2, %v7074
  %v7076 = vrot.slane %v6807, %v7075
  %v7077 = vlaneseq
  %v7078 = vshrl.u32 %v7077, 7
  %v7079 = vsub.s32 3, %v7078
  %v7080 = vrot.slane %v6807, %v7079
  %v7081 = vlaneseq
  %v7082 = vshrl.u32 %v7081, 7
  %v7083 = vsub.s32 4, %v7082
  %v7084 = vrot.slane %v6807, %v7083
  %v7085 = vlaneseq
  %v7086 = vshrl.u32 %v7085, 7
  %v7087 = vsub.s32 5, %v7086
  %v7088 = vrot.slane %v6807, %v7087
  %v7089 = vlaneseq
  %v7090 = vshrl.u32 %v7089, 7
  %v7091 = vsub.s32 6, %v7090
  %v7092 = vrot.slane %v6807, %v7091
  %v7093 = vlaneseq
  %v7094 = vshrl.u32 %v7093, 7
  %v7095 = vsub.s32 7, %v7094
  %v7096 = vrot.slane %v6807, %v7095
  %v7105 = vadd.f32 %v6808, %v7068
  %v7106 = vadd.f32 %v6809, %v7072
  %v7107 = vadd.f32 %v6810, %v7076
  %v7108 = vadd.f32 %v6811, %v7080
  %v7109 = vadd.f32 %v6812, %v7084
  %v7110 = vadd.f32 %v6813, %v7088
  %v7111 = vadd.f32 %v6814, %v7092
  %v7112 = vadd.f32 %v6815, %v7096
  %v7113 = vadd.f32 %v6816, %v7068
  %v7114 = vadd.f32 %v6817, %v7072
  %v7115 = vadd.f32 %v6818, %v7076
  %v7116 = vadd.f32 %v6819, %v7080
  %v7117 = vadd.f32 %v6820, %v7084
  %v7118 = vadd.f32 %v6821, %v7088
  %v7119 = vadd.f32 %v6822, %v7092
  %v7120 = vadd.f32 %v6823, %v7096
  %v7121 = vadd.f32 %v6824, %v7068
  %v7122 = vadd.f32 %v6825, %v7072
  %v7123 = vadd.f32 %v6826, %v7076
  %v7124 = vadd.f32 %v6827, %v7080
  %v7125 = vadd.f32 %v6828, %v7084
  %v7126 = vadd.f32 %v6829, %v7088
  %v7127 = vadd.f32 %v6830, %v7092
  %v7128 = vadd.f32 %v6831, %v7096
  %v7129 = vadd.f32 %v6832, %v7068
  %v7130 = vadd.f32 %v6833, %v7072
  %v7131 = vadd.f32 %v6834, %v7076
  %v7132 = vadd.f32 %v6835, %v7080
  %v7133 = vadd.f32 %v6836, %v7084
  %v7134 = vadd.f32 %v6837, %v7088
  %v7135 = vadd.f32 %v6838, %v7092
  %v7136 = vadd.f32 %v6839, %v7096
  %v7137 = vadd.f32 %v6840, %v7068
  %v7138 = vadd.f32 %v6841, %v7072
  %v7139 = vadd.f32 %v6842, %v7076
  %v7140 = vadd.f32 %v6843, %v7080
  %v7141 = vadd.f32 %v6844, %v7084
  %v7142 = vadd.f32 %v6845, %v7088
  %v7143 = vadd.f32 %v6846, %v7092
  %v7144 = vadd.f32 %v6847, %v7096
  %v7145 = vadd.f32 %v6848, %v7068
  %v7146 = vadd.f32 %v6849, %v7072
  %v7147 = vadd.f32 %v6850, %v7076
  %v7148 = vadd.f32 %v6851, %v7080
  %v7149 = vadd.f32 %v6852, %v7084
  %v7150 = vadd.f32 %v6853, %v7088
  %v7151 = vadd.f32 %v6854, %v7092
  %v7152 = vadd.f32 %v6855, %v7096
  %v7153 = vadd.f32 %v6856, %v7068
  %v7154 = vadd.f32 %v6857, %v7072
  %v7155 = vadd.f32 %v6858, %v7076
  %v7156 = vadd.f32 %v6859, %v7080
  %v7157 = vadd.f32 %v6860, %v7084
  %v7158 = vadd.f32 %v6861, %v7088
  %v7159 = vadd.f32 %v6862, %v7092
  %v7160 = vadd.f32 %v6863, %v7096
  %v7161 = vadd.f32 %v6864, %v7068
  %v7162 = vadd.f32 %v6865, %v7072
  %v7163 = vadd.f32 %v6866, %v7076
  %v7164 = vadd.f32 %v6867, %v7080
  %v7165 = vadd.f32 %v6868, %v7084
  %v7166 = vadd.f32 %v6869, %v7088
  %v7167 = vadd.f32 %v6870, %v7092
  %v7168 = vadd.f32 %v6871, %v7096
  %v7169 = vadd.f32 %v6872, %v7068
  %v7170 = vadd.f32 %v6873, %v7072
  %v7171 = vadd.f32 %v6874, %v7076
  %v7172 = vadd.f32 %v6875, %v7080
  %v7173 = vadd.f32 %v6876, %v7084
  %v7174 = vadd.f32 %v6877, %v7088
  %v7175 = vadd.f32 %v6878, %v7092
  %v7176 = vadd.f32 %v6879, %v7096
  %v7177 = vadd.f32 %v6880, %v7068
  %v7178 = vadd.f32 %v6881, %v7072
  %v7179 = vadd.f32 %v6882, %v7076
  %v7180 = vadd.f32 %v6883, %v7080
  %v7181 = vadd.f32 %v6884, %v7084
  %v7182 = vadd.f32 %v6885, %v7088
  %v7183 = vadd.f32 %v6886, %v7092
  %v7184 = vadd.f32 %v6887, %v7096
  %v7185 = vadd.f32 %v6888, %v7068
  %v7186 = vadd.f32 %v6889, %v7072
  %v7187 = vadd.f32 %v6890, %v7076
  %v7188 = vadd.f32 %v6891, %v7080
  %v7189 = vadd.f32 %v6892, %v7084
  %v7190 = vadd.f32 %v6893, %v7088
  %v7191 = vadd.f32 %v6894, %v7092
  %v7192 = vadd.f32 %v6895, %v7096
  %v7193 = vadd.f32 %v6896, %v7068
  %v7194 = vadd.f32 %v6897, %v7072
  %v7195 = vadd.f32 %v6898, %v7076
  %v7196 = vadd.f32 %v6899, %v7080
  %v7197 = vadd.f32 %v6900, %v7084
  %v7198 = vadd.f32 %v6901, %v7088
  %v7199 = vadd.f32 %v6902, %v7092
  %v7200 = vadd.f32 %v6903, %v7096
  %v7201 = vadd.f32 %v6904, %v7068
  %v7202 = vadd.f32 %v6905, %v7072
  %v7203 = vadd.f32 %v6906, %v7076
  %v7204 = vadd.f32 %v6907, %v7080
  %v7205 = vadd.f32 %v6908, %v7084
  %v7206 = vadd.f32 %v6909, %v7088
  %v7207 = vadd.f32 %v6910, %v7092
  %v7208 = vadd.f32 %v6911, %v7096
  %v7209 = vadd.f32 %v6912, %v7068
  %v7210 = vadd.f32 %v6913, %v7072
  %v7211 = vadd.f32 %v6914, %v7076
  %v7212 = vadd.f32 %v6915, %v7080
  %v7213 = vadd.f32 %v6916, %v7084
  %v7214 = vadd.f32 %v6917, %v7088
  %v7215 = vadd.f32 %v6918, %v7092
  %v7216 = vadd.f32 %v6919, %v7096
  %v7217 = vadd.f32 %v6920, %v7068
  %v7218 = vadd.f32 %v6921, %v7072
  %v7219 = vadd.f32 %v6922, %v7076
  %v7220 = vadd.f32 %v6923, %v7080
  %v7221 = vadd.f32 %v6924, %v7084
  %v7222 = vadd.f32 %v6925, %v7088
  %v7223 = vadd.f32 %v6926, %v7092
  %v7224 = vadd.f32 %v6927, %v7096
  %v7225 = vadd.f32 %v6928, %v7068
  %v7226 = vadd.f32 %v6929, %v7072
  %v7227 = vadd.f32 %v6930, %v7076
  %v7228 = vadd.f32 %v6931, %v7080
  %v7229 = vadd.f32 %v6932, %v7084
  %v7230 = vadd.f32 %v6933, %v7088
  %v7231 = vadd.f32 %v6934, %v7092
  %v7232 = vadd.f32 %v6935, %v7096
  %v7233 = vadd.f32 %v6936, %v7068
  %v7234 = vadd.f32 %v6937, %v7072
  %v7235 = vadd.f32 %v6938, %v7076
  %v7236 = vadd.f32 %v6939, %v7080
  %v7237 = vadd.f32 %v6940, %v7084
  %v7238 = vadd.f32 %v6941, %v7088
  %v7239 = vadd.f32 %v6942, %v7092
  %v7240 = vadd.f32 %v6943, %v7096
  %v7241 = vadd.f32 %v6944, %v7068
  %v7242 = vadd.f32 %v6945, %v7072
  %v7243 = vadd.f32 %v6946, %v7076
  %v7244 = vadd.f32 %v6947, %v7080
  %v7245 = vadd.f32 %v6948, %v7084
  %v7246 = vadd.f32 %v6949, %v7088
  %v7247 = vadd.f32 %v6950, %v7092
  %v7248 = vadd.f32 %v6951, %v7096
  %v7249 = vadd.f32 %v6952, %v7068
  %v7250 = vadd.f32 %v6953, %v7072
  %v7251 = vadd.f32 %v6954, %v7076
  %v7252 = vadd.f32 %v6955, %v7080
  %v7253 = vadd.f32 %v6956, %v7084
  %v7254 = vadd.f32 %v6957, %v7088
  %v7255 = vadd.f32 %v6958, %v7092
  %v7256 = vadd.f32 %v6959, %v7096
  %v7257 = vadd.f32 %v6960, %v7068
  %v7258 = vadd.f32 %v6961, %v7072
  %v7259 = vadd.f32 %v6962, %v7076
  %v7260 = vadd.f32 %v6963, %v7080
  %v7261 = vadd.f32 %v6964, %v7084
  %v7262 = vadd.f32 %v6965, %v7088
  %v7263 = vadd.f32 %v6966, %v7092
  %v7264 = vadd.f32 %v6967, %v7096
  %v7265 = vadd.f32 %v6968, %v7068
  %v7266 = vadd.f32 %v6969, %v7072
  %v7267 = vadd.f32 %v6970, %v7076
  %v7268 = vadd.f32 %v6971, %v7080
  %v7269 = vadd.f32 %v6972, %v7084
  %v7270 = vadd.f32 %v6973, %v7088
  %v7271 = vadd.f32 %v6974, %v7092
  %v7272 = vadd.f32 %v6975, %v7096
  %v7273 = vadd.f32 %v6976, %v7068
  %v7274 = vadd.f32 %v6977, %v7072
  %v7275 = vadd.f32 %v6978, %v7076
  %v7276 = vadd.f32 %v6979, %v7080
  %v7277 = vadd.f32 %v6980, %v7084
  %v7278 = vadd.f32 %v6981, %v7088
  %v7279 = vadd.f32 %v6982, %v7092
  %v7280 = vadd.f32 %v6983, %v7096
  %v7281 = vadd.f32 %v6984, %v7068
  %v7282 = vadd.f32 %v6985, %v7072
  %v7283 = vadd.f32 %v6986, %v7076
  %v7284 = vadd.f32 %v6987, %v7080
  %v7285 = vadd.f32 %v6988, %v7084
  %v7286 = vadd.f32 %v6989, %v7088
  %v7287 = vadd.f32 %v6990, %v7092
  %v7288 = vadd.f32 %v6991, %v7096
  %v7289 = vadd.f32 %v6992, %v7068
  %v7290 = vadd.f32 %v6993, %v7072
  %v7291 = vadd.f32 %v6994, %v7076
  %v7292 = vadd.f32 %v6995, %v7080
  %v7293 = vadd.f32 %v6996, %v7084
  %v7294 = vadd.f32 %v6997, %v7088
  %v7295 = vadd.f32 %v6998, %v7092
  %v7296 = vadd.f32 %v6999, %v7096
  %v7297 = vadd.f32 %v7000, %v7068
  %v7298 = vadd.f32 %v7001, %v7072
  %v7299 = vadd.f32 %v7002, %v7076
  %v7300 = vadd.f32 %v7003, %v7080
  %v7301 = vadd.f32 %v7004, %v7084
  %v7302 = vadd.f32 %v7005, %v7088
  %v7303 = vadd.f32 %v7006, %v7092
  %v7304 = vadd.f32 %v7007, %v7096
  %v7305 = vadd.f32 %v7008, %v7068
  %v7306 = vadd.f32 %v7009, %v7072
  %v7307 = vadd.f32 %v7010, %v7076
  %v7308 = vadd.f32 %v7011, %v7080
  %v7309 = vadd.f32 %v7012, %v7084
  %v7310 = vadd.f32 %v7013, %v7088
  %v7311 = vadd.f32 %v7014, %v7092
  %v7312 = vadd.f32 %v7015, %v7096
  %v7313 = vadd.f32 %v7016, %v7068
  %v7314 = vadd.f32 %v7017, %v7072
  %v7315 = vadd.f32 %v7018, %v7076
  %v7316 = vadd.f32 %v7019, %v7080
  %v7317 = vadd.f32 %v7020, %v7084
  %v7318 = vadd.f32 %v7021, %v7088
  %v7319 = vadd.f32 %v7022, %v7092
  %v7320 = vadd.f32 %v7023, %v7096
  %v7321 = vadd.f32 %v7024, %v7068
  %v7322 = vadd.f32 %v7025, %v7072
  %v7323 = vadd.f32 %v7026, %v7076
  %v7324 = vadd.f32 %v7027, %v7080
  %v7325 = vadd.f32 %v7028, %v7084
  %v7326 = vadd.f32 %v7029, %v7088
  %v7327 = vadd.f32 %v7030, %v7092
  %v7328 = vadd.f32 %v7031, %v7096
  %v7329 = vadd.f32 %v7032, %v7068
  %v7330 = vadd.f32 %v7033, %v7072
  %v7331 = vadd.f32 %v7034, %v7076
  %v7332 = vadd.f32 %v7035, %v7080
  %v7333 = vadd.f32 %v7036, %v7084
  %v7334 = vadd.f32 %v7037, %v7088
  %v7335 = vadd.f32 %v7038, %v7092
  %v7336 = vadd.f32 %v7039, %v7096
  %v7337 = vadd.f32 %v7040, %v7068
  %v7338 = vadd.f32 %v7041, %v7072
  %v7339 = vadd.f32 %v7042, %v7076
  %v7340 = vadd.f32 %v7043, %v7080
  %v7341 = vadd.f32 %v7044, %v7084
  %v7342 = vadd.f32 %v7045, %v7088
  %v7343 = vadd.f32 %v7046, %v7092
  %v7344 = vadd.f32 %v7047, %v7096
  %v7345 = vadd.f32 %v7048, %v7068
  %v7346 = vadd.f32 %v7049, %v7072
  %v7347 = vadd.f32 %v7050, %v7076
  %v7348 = vadd.f32 %v7051, %v7080
  %v7349 = vadd.f32 %v7052, %v7084
  %v7350 = vadd.f32 %v7053, %v7088
  %v7351 = vadd.f32 %v7054, %v7092
  %v7352 = vadd.f32 %v7055, %v7096
  %v7353 = vadd.f32 %v7056, %v7068
  %v7354 = vadd.f32 %v7057, %v7072
  %v7355 = vadd.f32 %v7058, %v7076
  %v7356 = vadd.f32 %v7059, %v7080
  %v7357 = vadd.f32 %v7060, %v7084
  %v7358 = vadd.f32 %v7061, %v7088
  %v7359 = vadd.f32 %v7062, %v7092
  %v7360 = vadd.f32 %v7063, %v7096
  %vm7361 = vcmp.gt.f32.partialorder %v7105, 0.0
  %vm7362 = vcmp.gt.f32.partialorder %v7106, 0.0
  %vm7363 = vcmp.gt.f32.partialorder %v7107, 0.0
  %vm7364 = vcmp.gt.f32.partialorder %v7108, 0.0
  %vm7365 = vcmp.gt.f32.partialorder %v7109, 0.0
  %vm7366 = vcmp.gt.f32.partialorder %v7110, 0.0
  %vm7367 = vcmp.gt.f32.partialorder %v7111, 0.0
  %vm7368 = vcmp.gt.f32.partialorder %v7112, 0.0
  %vm7369 = vcmp.gt.f32.partialorder %v7113, 0.0
  %vm7370 = vcmp.gt.f32.partialorder %v7114, 0.0
  %vm7371 = vcmp.gt.f32.partialorder %v7115, 0.0
  %vm7372 = vcmp.gt.f32.partialorder %v7116, 0.0
  %vm7373 = vcmp.gt.f32.partialorder %v7117, 0.0
  %vm7374 = vcmp.gt.f32.partialorder %v7118, 0.0
  %vm7375 = vcmp.gt.f32.partialorder %v7119, 0.0
  %vm7376 = vcmp.gt.f32.partialorder %v7120, 0.0
  %vm7377 = vcmp.gt.f32.partialorder %v7121, 0.0
  %vm7378 = vcmp.gt.f32.partialorder %v7122, 0.0
  %vm7379 = vcmp.gt.f32.partialorder %v7123, 0.0
  %vm7380 = vcmp.gt.f32.partialorder %v7124, 0.0
  %vm7381 = vcmp.gt.f32.partialorder %v7125, 0.0
  %vm7382 = vcmp.gt.f32.partialorder %v7126, 0.0
  %vm7383 = vcmp.gt.f32.partialorder %v7127, 0.0
  %vm7384 = vcmp.gt.f32.partialorder %v7128, 0.0
  %vm7385 = vcmp.gt.f32.partialorder %v7129, 0.0
  %vm7386 = vcmp.gt.f32.partialorder %v7130, 0.0
  %vm7387 = vcmp.gt.f32.partialorder %v7131, 0.0
  %vm7388 = vcmp.gt.f32.partialorder %v7132, 0.0
  %vm7389 = vcmp.gt.f32.partialorder %v7133, 0.0
  %vm7390 = vcmp.gt.f32.partialorder %v7134, 0.0
  %vm7391 = vcmp.gt.f32.partialorder %v7135, 0.0
  %vm7392 = vcmp.gt.f32.partialorder %v7136, 0.0
  %vm7393 = vcmp.gt.f32.partialorder %v7137, 0.0
  %vm7394 = vcmp.gt.f32.partialorder %v7138, 0.0
  %vm7395 = vcmp.gt.f32.partialorder %v7139, 0.0
  %vm7396 = vcmp.gt.f32.partialorder %v7140, 0.0
  %vm7397 = vcmp.gt.f32.partialorder %v7141, 0.0
  %vm7398 = vcmp.gt.f32.partialorder %v7142, 0.0
  %vm7399 = vcmp.gt.f32.partialorder %v7143, 0.0
  %vm7400 = vcmp.gt.f32.partialorder %v7144, 0.0
  %vm7401 = vcmp.gt.f32.partialorder %v7145, 0.0
  %vm7402 = vcmp.gt.f32.partialorder %v7146, 0.0
  %vm7403 = vcmp.gt.f32.partialorder %v7147, 0.0
  %vm7404 = vcmp.gt.f32.partialorder %v7148, 0.0
  %vm7405 = vcmp.gt.f32.partialorder %v7149, 0.0
  %vm7406 = vcmp.gt.f32.partialorder %v7150, 0.0
  %vm7407 = vcmp.gt.f32.partialorder %v7151, 0.0
  %vm7408 = vcmp.gt.f32.partialorder %v7152, 0.0
  %vm7409 = vcmp.gt.f32.partialorder %v7153, 0.0
  %vm7410 = vcmp.gt.f32.partialorder %v7154, 0.0
  %vm7411 = vcmp.gt.f32.partialorder %v7155, 0.0
  %vm7412 = vcmp.gt.f32.partialorder %v7156, 0.0
  %vm7413 = vcmp.gt.f32.partialorder %v7157, 0.0
  %vm7414 = vcmp.gt.f32.partialorder %v7158, 0.0
  %vm7415 = vcmp.gt.f32.partialorder %v7159, 0.0
  %vm7416 = vcmp.gt.f32.partialorder %v7160, 0.0
  %vm7417 = vcmp.gt.f32.partialorder %v7161, 0.0
  %vm7418 = vcmp.gt.f32.partialorder %v7162, 0.0
  %vm7419 = vcmp.gt.f32.partialorder %v7163, 0.0
  %vm7420 = vcmp.gt.f32.partialorder %v7164, 0.0
  %vm7421 = vcmp.gt.f32.partialorder %v7165, 0.0
  %vm7422 = vcmp.gt.f32.partialorder %v7166, 0.0
  %vm7423 = vcmp.gt.f32.partialorder %v7167, 0.0
  %vm7424 = vcmp.gt.f32.partialorder %v7168, 0.0
  %vm7425 = vcmp.gt.f32.partialorder %v7169, 0.0
  %vm7426 = vcmp.gt.f32.partialorder %v7170, 0.0
  %vm7427 = vcmp.gt.f32.partialorder %v7171, 0.0
  %vm7428 = vcmp.gt.f32.partialorder %v7172, 0.0
  %vm7429 = vcmp.gt.f32.partialorder %v7173, 0.0
  %vm7430 = vcmp.gt.f32.partialorder %v7174, 0.0
  %vm7431 = vcmp.gt.f32.partialorder %v7175, 0.0
  %vm7432 = vcmp.gt.f32.partialorder %v7176, 0.0
  %vm7433 = vcmp.gt.f32.partialorder %v7177, 0.0
  %vm7434 = vcmp.gt.f32.partialorder %v7178, 0.0
  %vm7435 = vcmp.gt.f32.partialorder %v7179, 0.0
  %vm7436 = vcmp.gt.f32.partialorder %v7180, 0.0
  %vm7437 = vcmp.gt.f32.partialorder %v7181, 0.0
  %vm7438 = vcmp.gt.f32.partialorder %v7182, 0.0
  %vm7439 = vcmp.gt.f32.partialorder %v7183, 0.0
  %vm7440 = vcmp.gt.f32.partialorder %v7184, 0.0
  %vm7441 = vcmp.gt.f32.partialorder %v7185, 0.0
  %vm7442 = vcmp.gt.f32.partialorder %v7186, 0.0
  %vm7443 = vcmp.gt.f32.partialorder %v7187, 0.0
  %vm7444 = vcmp.gt.f32.partialorder %v7188, 0.0
  %vm7445 = vcmp.gt.f32.partialorder %v7189, 0.0
  %vm7446 = vcmp.gt.f32.partialorder %v7190, 0.0
  %vm7447 = vcmp.gt.f32.partialorder %v7191, 0.0
  %vm7448 = vcmp.gt.f32.partialorder %v7192, 0.0
  %vm7449 = vcmp.gt.f32.partialorder %v7193, 0.0
  %vm7450 = vcmp.gt.f32.partialorder %v7194, 0.0
  %vm7451 = vcmp.gt.f32.partialorder %v7195, 0.0
  %vm7452 = vcmp.gt.f32.partialorder %v7196, 0.0
  %vm7453 = vcmp.gt.f32.partialorder %v7197, 0.0
  %vm7454 = vcmp.gt.f32.partialorder %v7198, 0.0
  %vm7455 = vcmp.gt.f32.partialorder %v7199, 0.0
  %vm7456 = vcmp.gt.f32.partialorder %v7200, 0.0
  %vm7457 = vcmp.gt.f32.partialorder %v7201, 0.0
  %vm7458 = vcmp.gt.f32.partialorder %v7202, 0.0
  %vm7459 = vcmp.gt.f32.partialorder %v7203, 0.0
  %vm7460 = vcmp.gt.f32.partialorder %v7204, 0.0
  %vm7461 = vcmp.gt.f32.partialorder %v7205, 0.0
  %vm7462 = vcmp.gt.f32.partialorder %v7206, 0.0
  %vm7463 = vcmp.gt.f32.partialorder %v7207, 0.0
  %vm7464 = vcmp.gt.f32.partialorder %v7208, 0.0
  %vm7465 = vcmp.gt.f32.partialorder %v7209, 0.0
  %vm7466 = vcmp.gt.f32.partialorder %v7210, 0.0
  %vm7467 = vcmp.gt.f32.partialorder %v7211, 0.0
  %vm7468 = vcmp.gt.f32.partialorder %v7212, 0.0
  %vm7469 = vcmp.gt.f32.partialorder %v7213, 0.0
  %vm7470 = vcmp.gt.f32.partialorder %v7214, 0.0
  %vm7471 = vcmp.gt.f32.partialorder %v7215, 0.0
  %vm7472 = vcmp.gt.f32.partialorder %v7216, 0.0
  %vm7473 = vcmp.gt.f32.partialorder %v7217, 0.0
  %vm7474 = vcmp.gt.f32.partialorder %v7218, 0.0
  %vm7475 = vcmp.gt.f32.partialorder %v7219, 0.0
  %vm7476 = vcmp.gt.f32.partialorder %v7220, 0.0
  %vm7477 = vcmp.gt.f32.partialorder %v7221, 0.0
  %vm7478 = vcmp.gt.f32.partialorder %v7222, 0.0
  %vm7479 = vcmp.gt.f32.partialorder %v7223, 0.0
  %vm7480 = vcmp.gt.f32.partialorder %v7224, 0.0
  %vm7481 = vcmp.gt.f32.partialorder %v7225, 0.0
  %vm7482 = vcmp.gt.f32.partialorder %v7226, 0.0
  %vm7483 = vcmp.gt.f32.partialorder %v7227, 0.0
  %vm7484 = vcmp.gt.f32.partialorder %v7228, 0.0
  %vm7485 = vcmp.gt.f32.partialorder %v7229, 0.0
  %vm7486 = vcmp.gt.f32.partialorder %v7230, 0.0
  %vm7487 = vcmp.gt.f32.partialorder %v7231, 0.0
  %vm7488 = vcmp.gt.f32.partialorder %v7232, 0.0
  %vm7489 = vcmp.gt.f32.partialorder %v7233, 0.0
  %vm7490 = vcmp.gt.f32.partialorder %v7234, 0.0
  %vm7491 = vcmp.gt.f32.partialorder %v7235, 0.0
  %vm7492 = vcmp.gt.f32.partialorder %v7236, 0.0
  %vm7493 = vcmp.gt.f32.partialorder %v7237, 0.0
  %vm7494 = vcmp.gt.f32.partialorder %v7238, 0.0
  %vm7495 = vcmp.gt.f32.partialorder %v7239, 0.0
  %vm7496 = vcmp.gt.f32.partialorder %v7240, 0.0
  %vm7497 = vcmp.gt.f32.partialorder %v7241, 0.0
  %vm7498 = vcmp.gt.f32.partialorder %v7242, 0.0
  %vm7499 = vcmp.gt.f32.partialorder %v7243, 0.0
  %vm7500 = vcmp.gt.f32.partialorder %v7244, 0.0
  %vm7501 = vcmp.gt.f32.partialorder %v7245, 0.0
  %vm7502 = vcmp.gt.f32.partialorder %v7246, 0.0
  %vm7503 = vcmp.gt.f32.partialorder %v7247, 0.0
  %vm7504 = vcmp.gt.f32.partialorder %v7248, 0.0
  %vm7505 = vcmp.gt.f32.partialorder %v7249, 0.0
  %vm7506 = vcmp.gt.f32.partialorder %v7250, 0.0
  %vm7507 = vcmp.gt.f32.partialorder %v7251, 0.0
  %vm7508 = vcmp.gt.f32.partialorder %v7252, 0.0
  %vm7509 = vcmp.gt.f32.partialorder %v7253, 0.0
  %vm7510 = vcmp.gt.f32.partialorder %v7254, 0.0
  %vm7511 = vcmp.gt.f32.partialorder %v7255, 0.0
  %vm7512 = vcmp.gt.f32.partialorder %v7256, 0.0
  %vm7513 = vcmp.gt.f32.partialorder %v7257, 0.0
  %vm7514 = vcmp.gt.f32.partialorder %v7258, 0.0
  %vm7515 = vcmp.gt.f32.partialorder %v7259, 0.0
  %vm7516 = vcmp.gt.f32.partialorder %v7260, 0.0
  %vm7517 = vcmp.gt.f32.partialorder %v7261, 0.0
  %vm7518 = vcmp.gt.f32.partialorder %v7262, 0.0
  %vm7519 = vcmp.gt.f32.partialorder %v7263, 0.0
  %vm7520 = vcmp.gt.f32.partialorder %v7264, 0.0
  %vm7521 = vcmp.gt.f32.partialorder %v7265, 0.0
  %vm7522 = vcmp.gt.f32.partialorder %v7266, 0.0
  %vm7523 = vcmp.gt.f32.partialorder %v7267, 0.0
  %vm7524 = vcmp.gt.f32.partialorder %v7268, 0.0
  %vm7525 = vcmp.gt.f32.partialorder %v7269, 0.0
  %vm7526 = vcmp.gt.f32.partialorder %v7270, 0.0
  %vm7527 = vcmp.gt.f32.partialorder %v7271, 0.0
  %vm7528 = vcmp.gt.f32.partialorder %v7272, 0.0
  %vm7529 = vcmp.gt.f32.partialorder %v7273, 0.0
  %vm7530 = vcmp.gt.f32.partialorder %v7274, 0.0
  %vm7531 = vcmp.gt.f32.partialorder %v7275, 0.0
  %vm7532 = vcmp.gt.f32.partialorder %v7276, 0.0
  %vm7533 = vcmp.gt.f32.partialorder %v7277, 0.0
  %vm7534 = vcmp.gt.f32.partialorder %v7278, 0.0
  %vm7535 = vcmp.gt.f32.partialorder %v7279, 0.0
  %vm7536 = vcmp.gt.f32.partialorder %v7280, 0.0
  %vm7537 = vcmp.gt.f32.partialorder %v7281, 0.0
  %vm7538 = vcmp.gt.f32.partialorder %v7282, 0.0
  %vm7539 = vcmp.gt.f32.partialorder %v7283, 0.0
  %vm7540 = vcmp.gt.f32.partialorder %v7284, 0.0
  %vm7541 = vcmp.gt.f32.partialorder %v7285, 0.0
  %vm7542 = vcmp.gt.f32.partialorder %v7286, 0.0
  %vm7543 = vcmp.gt.f32.partialorder %v7287, 0.0
  %vm7544 = vcmp.gt.f32.partialorder %v7288, 0.0
  %vm7545 = vcmp.gt.f32.partialorder %v7289, 0.0
  %vm7546 = vcmp.gt.f32.partialorder %v7290, 0.0
  %vm7547 = vcmp.gt.f32.partialorder %v7291, 0.0
  %vm7548 = vcmp.gt.f32.partialorder %v7292, 0.0
  %vm7549 = vcmp.gt.f32.partialorder %v7293, 0.0
  %vm7550 = vcmp.gt.f32.partialorder %v7294, 0.0
  %vm7551 = vcmp.gt.f32.partialorder %v7295, 0.0
  %vm7552 = vcmp.gt.f32.partialorder %v7296, 0.0
  %vm7553 = vcmp.gt.f32.partialorder %v7297, 0.0
  %vm7554 = vcmp.gt.f32.partialorder %v7298, 0.0
  %vm7555 = vcmp.gt.f32.partialorder %v7299, 0.0
  %vm7556 = vcmp.gt.f32.partialorder %v7300, 0.0
  %vm7557 = vcmp.gt.f32.partialorder %v7301, 0.0
  %vm7558 = vcmp.gt.f32.partialorder %v7302, 0.0
  %vm7559 = vcmp.gt.f32.partialorder %v7303, 0.0
  %vm7560 = vcmp.gt.f32.partialorder %v7304, 0.0
  %vm7561 = vcmp.gt.f32.partialorder %v7305, 0.0
  %vm7562 = vcmp.gt.f32.partialorder %v7306, 0.0
  %vm7563 = vcmp.gt.f32.partialorder %v7307, 0.0
  %vm7564 = vcmp.gt.f32.partialorder %v7308, 0.0
  %vm7565 = vcmp.gt.f32.partialorder %v7309, 0.0
  %vm7566 = vcmp.gt.f32.partialorder %v7310, 0.0
  %vm7567 = vcmp.gt.f32.partialorder %v7311, 0.0
  %vm7568 = vcmp.gt.f32.partialorder %v7312, 0.0
  %vm7569 = vcmp.gt.f32.partialorder %v7313, 0.0
  %vm7570 = vcmp.gt.f32.partialorder %v7314, 0.0
  %vm7571 = vcmp.gt.f32.partialorder %v7315, 0.0
  %vm7572 = vcmp.gt.f32.partialorder %v7316, 0.0
  %vm7573 = vcmp.gt.f32.partialorder %v7317, 0.0
  %vm7574 = vcmp.gt.f32.partialorder %v7318, 0.0
  %vm7575 = vcmp.gt.f32.partialorder %v7319, 0.0
  %vm7576 = vcmp.gt.f32.partialorder %v7320, 0.0
  %vm7577 = vcmp.gt.f32.partialorder %v7321, 0.0
  %vm7578 = vcmp.gt.f32.partialorder %v7322, 0.0
  %vm7579 = vcmp.gt.f32.partialorder %v7323, 0.0
  %vm7580 = vcmp.gt.f32.partialorder %v7324, 0.0
  %vm7581 = vcmp.gt.f32.partialorder %v7325, 0.0
  %vm7582 = vcmp.gt.f32.partialorder %v7326, 0.0
  %vm7583 = vcmp.gt.f32.partialorder %v7327, 0.0
  %vm7584 = vcmp.gt.f32.partialorder %v7328, 0.0
  %vm7585 = vcmp.gt.f32.partialorder %v7329, 0.0
  %vm7586 = vcmp.gt.f32.partialorder %v7330, 0.0
  %vm7587 = vcmp.gt.f32.partialorder %v7331, 0.0
  %vm7588 = vcmp.gt.f32.partialorder %v7332, 0.0
  %vm7589 = vcmp.gt.f32.partialorder %v7333, 0.0
  %vm7590 = vcmp.gt.f32.partialorder %v7334, 0.0
  %vm7591 = vcmp.gt.f32.partialorder %v7335, 0.0
  %vm7592 = vcmp.gt.f32.partialorder %v7336, 0.0
  %vm7593 = vcmp.gt.f32.partialorder %v7337, 0.0
  %vm7594 = vcmp.gt.f32.partialorder %v7338, 0.0
  %vm7595 = vcmp.gt.f32.partialorder %v7339, 0.0
  %vm7596 = vcmp.gt.f32.partialorder %v7340, 0.0
  %vm7597 = vcmp.gt.f32.partialorder %v7341, 0.0
  %vm7598 = vcmp.gt.f32.partialorder %v7342, 0.0
  %vm7599 = vcmp.gt.f32.partialorder %v7343, 0.0
  %vm7600 = vcmp.gt.f32.partialorder %v7344, 0.0
  %vm7601 = vcmp.gt.f32.partialorder %v7345, 0.0
  %vm7602 = vcmp.gt.f32.partialorder %v7346, 0.0
  %vm7603 = vcmp.gt.f32.partialorder %v7347, 0.0
  %vm7604 = vcmp.gt.f32.partialorder %v7348, 0.0
  %vm7605 = vcmp.gt.f32.partialorder %v7349, 0.0
  %vm7606 = vcmp.gt.f32.partialorder %v7350, 0.0
  %vm7607 = vcmp.gt.f32.partialorder %v7351, 0.0
  %vm7608 = vcmp.gt.f32.partialorder %v7352, 0.0
  %vm7609 = vcmp.gt.f32.partialorder %v7353, 0.0
  %vm7610 = vcmp.gt.f32.partialorder %v7354, 0.0
  %vm7611 = vcmp.gt.f32.partialorder %v7355, 0.0
  %vm7612 = vcmp.gt.f32.partialorder %v7356, 0.0
  %vm7613 = vcmp.gt.f32.partialorder %v7357, 0.0
  %vm7614 = vcmp.gt.f32.partialorder %v7358, 0.0
  %vm7615 = vcmp.gt.f32.partialorder %v7359, 0.0
  %vm7616 = vcmp.gt.f32.partialorder %v7360, 0.0
  %v7617 = vmul.f32 %v7105, 0.2
  %v7618 = vmul.f32 %v7106, 0.2
  %v7619 = vmul.f32 %v7107, 0.2
  %v7620 = vmul.f32 %v7108, 0.2
  %v7621 = vmul.f32 %v7109, 0.2
  %v7622 = vmul.f32 %v7110, 0.2
  %v7623 = vmul.f32 %v7111, 0.2
  %v7624 = vmul.f32 %v7112, 0.2
  %v7625 = vmul.f32 %v7113, 0.2
  %v7626 = vmul.f32 %v7114, 0.2
  %v7627 = vmul.f32 %v7115, 0.2
  %v7628 = vmul.f32 %v7116, 0.2
  %v7629 = vmul.f32 %v7117, 0.2
  %v7630 = vmul.f32 %v7118, 0.2
  %v7631 = vmul.f32 %v7119, 0.2
  %v7632 = vmul.f32 %v7120, 0.2
  %v7633 = vmul.f32 %v7121, 0.2
  %v7634 = vmul.f32 %v7122, 0.2
  %v7635 = vmul.f32 %v7123, 0.2
  %v7636 = vmul.f32 %v7124, 0.2
  %v7637 = vmul.f32 %v7125, 0.2
  %v7638 = vmul.f32 %v7126, 0.2
  %v7639 = vmul.f32 %v7127, 0.2
  %v7640 = vmul.f32 %v7128, 0.2
  %v7641 = vmul.f32 %v7129, 0.2
  %v7642 = vmul.f32 %v7130, 0.2
  %v7643 = vmul.f32 %v7131, 0.2
  %v7644 = vmul.f32 %v7132, 0.2
  %v7645 = vmul.f32 %v7133, 0.2
  %v7646 = vmul.f32 %v7134, 0.2
  %v7647 = vmul.f32 %v7135, 0.2
  %v7648 = vmul.f32 %v7136, 0.2
  %v7649 = vmul.f32 %v7137, 0.2
  %v7650 = vmul.f32 %v7138, 0.2
  %v7651 = vmul.f32 %v7139, 0.2
  %v7652 = vmul.f32 %v7140, 0.2
  %v7653 = vmul.f32 %v7141, 0.2
  %v7654 = vmul.f32 %v7142, 0.2
  %v7655 = vmul.f32 %v7143, 0.2
  %v7656 = vmul.f32 %v7144, 0.2
  %v7657 = vmul.f32 %v7145, 0.2
  %v7658 = vmul.f32 %v7146, 0.2
  %v7659 = vmul.f32 %v7147, 0.2
  %v7660 = vmul.f32 %v7148, 0.2
  %v7661 = vmul.f32 %v7149, 0.2
  %v7662 = vmul.f32 %v7150, 0.2
  %v7663 = vmul.f32 %v7151, 0.2
  %v7664 = vmul.f32 %v7152, 0.2
  %v7665 = vmul.f32 %v7153, 0.2
  %v7666 = vmul.f32 %v7154, 0.2
  %v7667 = vmul.f32 %v7155, 0.2
  %v7668 = vmul.f32 %v7156, 0.2
  %v7669 = vmul.f32 %v7157, 0.2
  %v7670 = vmul.f32 %v7158, 0.2
  %v7671 = vmul.f32 %v7159, 0.2
  %v7672 = vmul.f32 %v7160, 0.2
  %v7673 = vmul.f32 %v7161, 0.2
  %v7674 = vmul.f32 %v7162, 0.2
  %v7675 = vmul.f32 %v7163, 0.2
  %v7676 = vmul.f32 %v7164, 0.2
  %v7677 = vmul.f32 %v7165, 0.2
  %v7678 = vmul.f32 %v7166, 0.2
  %v7679 = vmul.f32 %v7167, 0.2
  %v7680 = vmul.f32 %v7168, 0.2
  %v7681 = vmul.f32 %v7169, 0.2
  %v7682 = vmul.f32 %v7170, 0.2
  %v7683 = vmul.f32 %v7171, 0.2
  %v7684 = vmul.f32 %v7172, 0.2
  %v7685 = vmul.f32 %v7173, 0.2
  %v7686 = vmul.f32 %v7174, 0.2
  %v7687 = vmul.f32 %v7175, 0.2
  %v7688 = vmul.f32 %v7176, 0.2
  %v7689 = vmul.f32 %v7177, 0.2
  %v7690 = vmul.f32 %v7178, 0.2
  %v7691 = vmul.f32 %v7179, 0.2
  %v7692 = vmul.f32 %v7180, 0.2
  %v7693 = vmul.f32 %v7181, 0.2
  %v7694 = vmul.f32 %v7182, 0.2
  %v7695 = vmul.f32 %v7183, 0.2
  %v7696 = vmul.f32 %v7184, 0.2
  %v7697 = vmul.f32 %v7185, 0.2
  %v7698 = vmul.f32 %v7186, 0.2
  %v7699 = vmul.f32 %v7187, 0.2
  %v7700 = vmul.f32 %v7188, 0.2
  %v7701 = vmul.f32 %v7189, 0.2
  %v7702 = vmul.f32 %v7190, 0.2
  %v7703 = vmul.f32 %v7191, 0.2
  %v7704 = vmul.f32 %v7192, 0.2
  %v7705 = vmul.f32 %v7193, 0.2
  %v7706 = vmul.f32 %v7194, 0.2
  %v7707 = vmul.f32 %v7195, 0.2
  %v7708 = vmul.f32 %v7196, 0.2
  %v7709 = vmul.f32 %v7197, 0.2
  %v7710 = vmul.f32 %v7198, 0.2
  %v7711 = vmul.f32 %v7199, 0.2
  %v7712 = vmul.f32 %v7200, 0.2
  %v7713 = vmul.f32 %v7201, 0.2
  %v7714 = vmul.f32 %v7202, 0.2
  %v7715 = vmul.f32 %v7203, 0.2
  %v7716 = vmul.f32 %v7204, 0.2
  %v7717 = vmul.f32 %v7205, 0.2
  %v7718 = vmul.f32 %v7206, 0.2
  %v7719 = vmul.f32 %v7207, 0.2
  %v7720 = vmul.f32 %v7208, 0.2
  %v7721 = vmul.f32 %v7209, 0.2
  %v7722 = vmul.f32 %v7210, 0.2
  %v7723 = vmul.f32 %v7211, 0.2
  %v7724 = vmul.f32 %v7212, 0.2
  %v7725 = vmul.f32 %v7213, 0.2
  %v7726 = vmul.f32 %v7214, 0.2
  %v7727 = vmul.f32 %v7215, 0.2
  %v7728 = vmul.f32 %v7216, 0.2
  %v7729 = vmul.f32 %v7217, 0.2
  %v7730 = vmul.f32 %v7218, 0.2
  %v7731 = vmul.f32 %v7219, 0.2
  %v7732 = vmul.f32 %v7220, 0.2
  %v7733 = vmul.f32 %v7221, 0.2
  %v7734 = vmul.f32 %v7222, 0.2
  %v7735 = vmul.f32 %v7223, 0.2
  %v7736 = vmul.f32 %v7224, 0.2
  %v7737 = vmul.f32 %v7225, 0.2
  %v7738 = vmul.f32 %v7226, 0.2
  %v7739 = vmul.f32 %v7227, 0.2
  %v7740 = vmul.f32 %v7228, 0.2
  %v7741 = vmul.f32 %v7229, 0.2
  %v7742 = vmul.f32 %v7230, 0.2
  %v7743 = vmul.f32 %v7231, 0.2
  %v7744 = vmul.f32 %v7232, 0.2
  %v7745 = vmul.f32 %v7233, 0.2
  %v7746 = vmul.f32 %v7234, 0.2
  %v7747 = vmul.f32 %v7235, 0.2
  %v7748 = vmul.f32 %v7236, 0.2
  %v7749 = vmul.f32 %v7237, 0.2
  %v7750 = vmul.f32 %v7238, 0.2
  %v7751 = vmul.f32 %v7239, 0.2
  %v7752 = vmul.f32 %v7240, 0.2
  %v7753 = vmul.f32 %v7241, 0.2
  %v7754 = vmul.f32 %v7242, 0.2
  %v7755 = vmul.f32 %v7243, 0.2
  %v7756 = vmul.f32 %v7244, 0.2
  %v7757 = vmul.f32 %v7245, 0.2
  %v7758 = vmul.f32 %v7246, 0.2
  %v7759 = vmul.f32 %v7247, 0.2
  %v7760 = vmul.f32 %v7248, 0.2
  %v7761 = vmul.f32 %v7249, 0.2
  %v7762 = vmul.f32 %v7250, 0.2
  %v7763 = vmul.f32 %v7251, 0.2
  %v7764 = vmul.f32 %v7252, 0.2
  %v7765 = vmul.f32 %v7253, 0.2
  %v7766 = vmul.f32 %v7254, 0.2
  %v7767 = vmul.f32 %v7255, 0.2
  %v7768 = vmul.f32 %v7256, 0.2
  %v7769 = vmul.f32 %v7257, 0.2
  %v7770 = vmul.f32 %v7258, 0.2
  %v7771 = vmul.f32 %v7259, 0.2
  %v7772 = vmul.f32 %v7260, 0.2
  %v7773 = vmul.f32 %v7261, 0.2
  %v7774 = vmul.f32 %v7262, 0.2
  %v7775 = vmul.f32 %v7263, 0.2
  %v7776 = vmul.f32 %v7264, 0.2
  %v7777 = vmul.f32 %v7265, 0.2
  %v7778 = vmul.f32 %v7266, 0.2
  %v7779 = vmul.f32 %v7267, 0.2
  %v7780 = vmul.f32 %v7268, 0.2
  %v7781 = vmul.f32 %v7269, 0.2
  %v7782 = vmul.f32 %v7270, 0.2
  %v7783 = vmul.f32 %v7271, 0.2
  %v7784 = vmul.f32 %v7272, 0.2
  %v7785 = vmul.f32 %v7273, 0.2
  %v7786 = vmul.f32 %v7274, 0.2
  %v7787 = vmul.f32 %v7275, 0.2
  %v7788 = vmul.f32 %v7276, 0.2
  %v7789 = vmul.f32 %v7277, 0.2
  %v7790 = vmul.f32 %v7278, 0.2
  %v7791 = vmul.f32 %v7279, 0.2
  %v7792 = vmul.f32 %v7280, 0.2
  %v7793 = vmul.f32 %v7281, 0.2
  %v7794 = vmul.f32 %v7282, 0.2
  %v7795 = vmul.f32 %v7283, 0.2
  %v7796 = vmul.f32 %v7284, 0.2
  %v7797 = vmul.f32 %v7285, 0.2
  %v7798 = vmul.f32 %v7286, 0.2
  %v7799 = vmul.f32 %v7287, 0.2
  %v7800 = vmul.f32 %v7288, 0.2
  %v7801 = vmul.f32 %v7289, 0.2
  %v7802 = vmul.f32 %v7290, 0.2
  %v7803 = vmul.f32 %v7291, 0.2
  %v7804 = vmul.f32 %v7292, 0.2
  %v7805 = vmul.f32 %v7293, 0.2
  %v7806 = vmul.f32 %v7294, 0.2
  %v7807 = vmul.f32 %v7295, 0.2
  %v7808 = vmul.f32 %v7296, 0.2
  %v7809 = vmul.f32 %v7297, 0.2
  %v7810 = vmul.f32 %v7298, 0.2
  %v7811 = vmul.f32 %v7299, 0.2
  %v7812 = vmul.f32 %v7300, 0.2
  %v7813 = vmul.f32 %v7301, 0.2
  %v7814 = vmul.f32 %v7302, 0.2
  %v7815 = vmul.f32 %v7303, 0.2
  %v7816 = vmul.f32 %v7304, 0.2
  %v7817 = vmul.f32 %v7305, 0.2
  %v7818 = vmul.f32 %v7306, 0.2
  %v7819 = vmul.f32 %v7307, 0.2
  %v7820 = vmul.f32 %v7308, 0.2
  %v7821 = vmul.f32 %v7309, 0.2
  %v7822 = vmul.f32 %v7310, 0.2
  %v7823 = vmul.f32 %v7311, 0.2
  %v7824 = vmul.f32 %v7312, 0.2
  %v7825 = vmul.f32 %v7313, 0.2
  %v7826 = vmul.f32 %v7314, 0.2
  %v7827 = vmul.f32 %v7315, 0.2
  %v7828 = vmul.f32 %v7316, 0.2
  %v7829 = vmul.f32 %v7317, 0.2
  %v7830 = vmul.f32 %v7318, 0.2
  %v7831 = vmul.f32 %v7319, 0.2
  %v7832 = vmul.f32 %v7320, 0.2
  %v7833 = vmul.f32 %v7321, 0.2
  %v7834 = vmul.f32 %v7322, 0.2
  %v7835 = vmul.f32 %v7323, 0.2
  %v7836 = vmul.f32 %v7324, 0.2
  %v7837 = vmul.f32 %v7325, 0.2
  %v7838 = vmul.f32 %v7326, 0.2
  %v7839 = vmul.f32 %v7327, 0.2
  %v7840 = vmul.f32 %v7328, 0.2
  %v7841 = vmul.f32 %v7329, 0.2
  %v7842 = vmul.f32 %v7330, 0.2
  %v7843 = vmul.f32 %v7331, 0.2
  %v7844 = vmul.f32 %v7332, 0.2
  %v7845 = vmul.f32 %v7333, 0.2
  %v7846 = vmul.f32 %v7334, 0.2
  %v7847 = vmul.f32 %v7335, 0.2
  %v7848 = vmul.f32 %v7336, 0.2
  %v7849 = vmul.f32 %v7337, 0.2
  %v7850 = vmul.f32 %v7338, 0.2
  %v7851 = vmul.f32 %v7339, 0.2
  %v7852 = vmul.f32 %v7340, 0.2
  %v7853 = vmul.f32 %v7341, 0.2
  %v7854 = vmul.f32 %v7342, 0.2
  %v7855 = vmul.f32 %v7343, 0.2
  %v7856 = vmul.f32 %v7344, 0.2
  %v7857 = vmul.f32 %v7345, 0.2
  %v7858 = vmul.f32 %v7346, 0.2
  %v7859 = vmul.f32 %v7347, 0.2
  %v7860 = vmul.f32 %v7348, 0.2
  %v7861 = vmul.f32 %v7349, 0.2
  %v7862 = vmul.f32 %v7350, 0.2
  %v7863 = vmul.f32 %v7351, 0.2
  %v7864 = vmul.f32 %v7352, 0.2
  %v7865 = vmul.f32 %v7353, 0.2
  %v7866 = vmul.f32 %v7354, 0.2
  %v7867 = vmul.f32 %v7355, 0.2
  %v7868 = vmul.f32 %v7356, 0.2
  %v7869 = vmul.f32 %v7357, 0.2
  %v7870 = vmul.f32 %v7358, 0.2
  %v7871 = vmul.f32 %v7359, 0.2
  %v7872 = vmul.f32 %v7360, 0.2
  %v7873 = vsel %vm7361, %v7105, %v7617
  %v7874 = vsel %vm7362, %v7106, %v7618
  %v7875 = vsel %vm7363, %v7107, %v7619
  %v7876 = vsel %vm7364, %v7108, %v7620
  %v7877 = vsel %vm7365, %v7109, %v7621
  %v7878 = vsel %vm7366, %v7110, %v7622
  %v7879 = vsel %vm7367, %v7111, %v7623
  %v7880 = vsel %vm7368, %v7112, %v7624
  %v7881 = vsel %vm7369, %v7113, %v7625
  %v7882 = vsel %vm7370, %v7114, %v7626
  %v7883 = vsel %vm7371, %v7115, %v7627
  %v7884 = vsel %vm7372, %v7116, %v7628
  %v7885 = vsel %vm7373, %v7117, %v7629
  %v7886 = vsel %vm7374, %v7118, %v7630
  %v7887 = vsel %vm7375, %v7119, %v7631
  %v7888 = vsel %vm7376, %v7120, %v7632
  %v7889 = vsel %vm7377, %v7121, %v7633
  %v7890 = vsel %vm7378, %v7122, %v7634
  %v7891 = vsel %vm7379, %v7123, %v7635
  %v7892 = vsel %vm7380, %v7124, %v7636
  %v7893 = vsel %vm7381, %v7125, %v7637
  %v7894 = vsel %vm7382, %v7126, %v7638
  %v7895 = vsel %vm7383, %v7127, %v7639
  %v7896 = vsel %vm7384, %v7128, %v7640
  %v7897 = vsel %vm7385, %v7129, %v7641
  %v7898 = vsel %vm7386, %v7130, %v7642
  %v7899 = vsel %vm7387, %v7131, %v7643
  %v7900 = vsel %vm7388, %v7132, %v7644
  %v7901 = vsel %vm7389, %v7133, %v7645
  %v7902 = vsel %vm7390, %v7134, %v7646
  %v7903 = vsel %vm7391, %v7135, %v7647
  %v7904 = vsel %vm7392, %v7136, %v7648
  %v7905 = vsel %vm7393, %v7137, %v7649
  %v7906 = vsel %vm7394, %v7138, %v7650
  %v7907 = vsel %vm7395, %v7139, %v7651
  %v7908 = vsel %vm7396, %v7140, %v7652
  %v7909 = vsel %vm7397, %v7141, %v7653
  %v7910 = vsel %vm7398, %v7142, %v7654
  %v7911 = vsel %vm7399, %v7143, %v7655
  %v7912 = vsel %vm7400, %v7144, %v7656
  %v7913 = vsel %vm7401, %v7145, %v7657
  %v7914 = vsel %vm7402, %v7146, %v7658
  %v7915 = vsel %vm7403, %v7147, %v7659
  %v7916 = vsel %vm7404, %v7148, %v7660
  %v7917 = vsel %vm7405, %v7149, %v7661
  %v7918 = vsel %vm7406, %v7150, %v7662
  %v7919 = vsel %vm7407, %v7151, %v7663
  %v7920 = vsel %vm7408, %v7152, %v7664
  %v7921 = vsel %vm7409, %v7153, %v7665
  %v7922 = vsel %vm7410, %v7154, %v7666
  %v7923 = vsel %vm7411, %v7155, %v7667
  %v7924 = vsel %vm7412, %v7156, %v7668
  %v7925 = vsel %vm7413, %v7157, %v7669
  %v7926 = vsel %vm7414, %v7158, %v7670
  %v7927 = vsel %vm7415, %v7159, %v7671
  %v7928 = vsel %vm7416, %v7160, %v7672
  %v7929 = vsel %vm7417, %v7161, %v7673
  %v7930 = vsel %vm7418, %v7162, %v7674
  %v7931 = vsel %vm7419, %v7163, %v7675
  %v7932 = vsel %vm7420, %v7164, %v7676
  %v7933 = vsel %vm7421, %v7165, %v7677
  %v7934 = vsel %vm7422, %v7166, %v7678
  %v7935 = vsel %vm7423, %v7167, %v7679
  %v7936 = vsel %vm7424, %v7168, %v7680
  %v7937 = vsel %vm7425, %v7169, %v7681
  %v7938 = vsel %vm7426, %v7170, %v7682
  %v7939 = vsel %vm7427, %v7171, %v7683
  %v7940 = vsel %vm7428, %v7172, %v7684
  %v7941 = vsel %vm7429, %v7173, %v7685
  %v7942 = vsel %vm7430, %v7174, %v7686
  %v7943 = vsel %vm7431, %v7175, %v7687
  %v7944 = vsel %vm7432, %v7176, %v7688
  %v7945 = vsel %vm7433, %v7177, %v7689
  %v7946 = vsel %vm7434, %v7178, %v7690
  %v7947 = vsel %vm7435, %v7179, %v7691
  %v7948 = vsel %vm7436, %v7180, %v7692
  %v7949 = vsel %vm7437, %v7181, %v7693
  %v7950 = vsel %vm7438, %v7182, %v7694
  %v7951 = vsel %vm7439, %v7183, %v7695
  %v7952 = vsel %vm7440, %v7184, %v7696
  %v7953 = vsel %vm7441, %v7185, %v7697
  %v7954 = vsel %vm7442, %v7186, %v7698
  %v7955 = vsel %vm7443, %v7187, %v7699
  %v7956 = vsel %vm7444, %v7188, %v7700
  %v7957 = vsel %vm7445, %v7189, %v7701
  %v7958 = vsel %vm7446, %v7190, %v7702
  %v7959 = vsel %vm7447, %v7191, %v7703
  %v7960 = vsel %vm7448, %v7192, %v7704
  %v7961 = vsel %vm7449, %v7193, %v7705
  %v7962 = vsel %vm7450, %v7194, %v7706
  %v7963 = vsel %vm7451, %v7195, %v7707
  %v7964 = vsel %vm7452, %v7196, %v7708
  %v7965 = vsel %vm7453, %v7197, %v7709
  %v7966 = vsel %vm7454, %v7198, %v7710
  %v7967 = vsel %vm7455, %v7199, %v7711
  %v7968 = vsel %vm7456, %v7200, %v7712
  %v7969 = vsel %vm7457, %v7201, %v7713
  %v7970 = vsel %vm7458, %v7202, %v7714
  %v7971 = vsel %vm7459, %v7203, %v7715
  %v7972 = vsel %vm7460, %v7204, %v7716
  %v7973 = vsel %vm7461, %v7205, %v7717
  %v7974 = vsel %vm7462, %v7206, %v7718
  %v7975 = vsel %vm7463, %v7207, %v7719
  %v7976 = vsel %vm7464, %v7208, %v7720
  %v7977 = vsel %vm7465, %v7209, %v7721
  %v7978 = vsel %vm7466, %v7210, %v7722
  %v7979 = vsel %vm7467, %v7211, %v7723
  %v7980 = vsel %vm7468, %v7212, %v7724
  %v7981 = vsel %vm7469, %v7213, %v7725
  %v7982 = vsel %vm7470, %v7214, %v7726
  %v7983 = vsel %vm7471, %v7215, %v7727
  %v7984 = vsel %vm7472, %v7216, %v7728
  %v7985 = vsel %vm7473, %v7217, %v7729
  %v7986 = vsel %vm7474, %v7218, %v7730
  %v7987 = vsel %vm7475, %v7219, %v7731
  %v7988 = vsel %vm7476, %v7220, %v7732
  %v7989 = vsel %vm7477, %v7221, %v7733
  %v7990 = vsel %vm7478, %v7222, %v7734
  %v7991 = vsel %vm7479, %v7223, %v7735
  %v7992 = vsel %vm7480, %v7224, %v7736
  %v7993 = vsel %vm7481, %v7225, %v7737
  %v7994 = vsel %vm7482, %v7226, %v7738
  %v7995 = vsel %vm7483, %v7227, %v7739
  %v7996 = vsel %vm7484, %v7228, %v7740
  %v7997 = vsel %vm7485, %v7229, %v7741
  %v7998 = vsel %vm7486, %v7230, %v7742
  %v7999 = vsel %vm7487, %v7231, %v7743
  %v8000 = vsel %vm7488, %v7232, %v7744
  %v8001 = vsel %vm7489, %v7233, %v7745
  %v8002 = vsel %vm7490, %v7234, %v7746
  %v8003 = vsel %vm7491, %v7235, %v7747
  %v8004 = vsel %vm7492, %v7236, %v7748
  %v8005 = vsel %vm7493, %v7237, %v7749
  %v8006 = vsel %vm7494, %v7238, %v7750
  %v8007 = vsel %vm7495, %v7239, %v7751
  %v8008 = vsel %vm7496, %v7240, %v7752
  %v8009 = vsel %vm7497, %v7241, %v7753
  %v8010 = vsel %vm7498, %v7242, %v7754
  %v8011 = vsel %vm7499, %v7243, %v7755
  %v8012 = vsel %vm7500, %v7244, %v7756
  %v8013 = vsel %vm7501, %v7245, %v7757
  %v8014 = vsel %vm7502, %v7246, %v7758
  %v8015 = vsel %vm7503, %v7247, %v7759
  %v8016 = vsel %vm7504, %v7248, %v7760
  %v8017 = vsel %vm7505, %v7249, %v7761
  %v8018 = vsel %vm7506, %v7250, %v7762
  %v8019 = vsel %vm7507, %v7251, %v7763
  %v8020 = vsel %vm7508, %v7252, %v7764
  %v8021 = vsel %vm7509, %v7253, %v7765
  %v8022 = vsel %vm7510, %v7254, %v7766
  %v8023 = vsel %vm7511, %v7255, %v7767
  %v8024 = vsel %vm7512, %v7256, %v7768
  %v8025 = vsel %vm7513, %v7257, %v7769
  %v8026 = vsel %vm7514, %v7258, %v7770
  %v8027 = vsel %vm7515, %v7259, %v7771
  %v8028 = vsel %vm7516, %v7260, %v7772
  %v8029 = vsel %vm7517, %v7261, %v7773
  %v8030 = vsel %vm7518, %v7262, %v7774
  %v8031 = vsel %vm7519, %v7263, %v7775
  %v8032 = vsel %vm7520, %v7264, %v7776
  %v8033 = vsel %vm7521, %v7265, %v7777
  %v8034 = vsel %vm7522, %v7266, %v7778
  %v8035 = vsel %vm7523, %v7267, %v7779
  %v8036 = vsel %vm7524, %v7268, %v7780
  %v8037 = vsel %vm7525, %v7269, %v7781
  %v8038 = vsel %vm7526, %v7270, %v7782
  %v8039 = vsel %vm7527, %v7271, %v7783
  %v8040 = vsel %vm7528, %v7272, %v7784
  %v8041 = vsel %vm7529, %v7273, %v7785
  %v8042 = vsel %vm7530, %v7274, %v7786
  %v8043 = vsel %vm7531, %v7275, %v7787
  %v8044 = vsel %vm7532, %v7276, %v7788
  %v8045 = vsel %vm7533, %v7277, %v7789
  %v8046 = vsel %vm7534, %v7278, %v7790
  %v8047 = vsel %vm7535, %v7279, %v7791
  %v8048 = vsel %vm7536, %v7280, %v7792
  %v8049 = vsel %vm7537, %v7281, %v7793
  %v8050 = vsel %vm7538, %v7282, %v7794
  %v8051 = vsel %vm7539, %v7283, %v7795
  %v8052 = vsel %vm7540, %v7284, %v7796
  %v8053 = vsel %vm7541, %v7285, %v7797
  %v8054 = vsel %vm7542, %v7286, %v7798
  %v8055 = vsel %vm7543, %v7287, %v7799
  %v8056 = vsel %vm7544, %v7288, %v7800
  %v8057 = vsel %vm7545, %v7289, %v7801
  %v8058 = vsel %vm7546, %v7290, %v7802
  %v8059 = vsel %vm7547, %v7291, %v7803
  %v8060 = vsel %vm7548, %v7292, %v7804
  %v8061 = vsel %vm7549, %v7293, %v7805
  %v8062 = vsel %vm7550, %v7294, %v7806
  %v8063 = vsel %vm7551, %v7295, %v7807
  %v8064 = vsel %vm7552, %v7296, %v7808
  %v8065 = vsel %vm7553, %v7297, %v7809
  %v8066 = vsel %vm7554, %v7298, %v7810
  %v8067 = vsel %vm7555, %v7299, %v7811
  %v8068 = vsel %vm7556, %v7300, %v7812
  %v8069 = vsel %vm7557, %v7301, %v7813
  %v8070 = vsel %vm7558, %v7302, %v7814
  %v8071 = vsel %vm7559, %v7303, %v7815
  %v8072 = vsel %vm7560, %v7304, %v7816
  %v8073 = vsel %vm7561, %v7305, %v7817
  %v8074 = vsel %vm7562, %v7306, %v7818
  %v8075 = vsel %vm7563, %v7307, %v7819
  %v8076 = vsel %vm7564, %v7308, %v7820
  %v8077 = vsel %vm7565, %v7309, %v7821
  %v8078 = vsel %vm7566, %v7310, %v7822
  %v8079 = vsel %vm7567, %v7311, %v7823
  %v8080 = vsel %vm7568, %v7312, %v7824
  %v8081 = vsel %vm7569, %v7313, %v7825
  %v8082 = vsel %vm7570, %v7314, %v7826
  %v8083 = vsel %vm7571, %v7315, %v7827
  %v8084 = vsel %vm7572, %v7316, %v7828
  %v8085 = vsel %vm7573, %v7317, %v7829
  %v8086 = vsel %vm7574, %v7318, %v7830
  %v8087 = vsel %vm7575, %v7319, %v7831
  %v8088 = vsel %vm7576, %v7320, %v7832
  %v8089 = vsel %vm7577, %v7321, %v7833
  %v8090 = vsel %vm7578, %v7322, %v7834
  %v8091 = vsel %vm7579, %v7323, %v7835
  %v8092 = vsel %vm7580, %v7324, %v7836
  %v8093 = vsel %vm7581, %v7325, %v7837
  %v8094 = vsel %vm7582, %v7326, %v7838
  %v8095 = vsel %vm7583, %v7327, %v7839
  %v8096 = vsel %vm7584, %v7328, %v7840
  %v8097 = vsel %vm7585, %v7329, %v7841
  %v8098 = vsel %vm7586, %v7330, %v7842
  %v8099 = vsel %vm7587, %v7331, %v7843
  %v8100 = vsel %vm7588, %v7332, %v7844
  %v8101 = vsel %vm7589, %v7333, %v7845
  %v8102 = vsel %vm7590, %v7334, %v7846
  %v8103 = vsel %vm7591, %v7335, %v7847
  %v8104 = vsel %vm7592, %v7336, %v7848
  %v8105 = vsel %vm7593, %v7337, %v7849
  %v8106 = vsel %vm7594, %v7338, %v7850
  %v8107 = vsel %vm7595, %v7339, %v7851
  %v8108 = vsel %vm7596, %v7340, %v7852
  %v8109 = vsel %vm7597, %v7341, %v7853
  %v8110 = vsel %vm7598, %v7342, %v7854
  %v8111 = vsel %vm7599, %v7343, %v7855
  %v8112 = vsel %vm7600, %v7344, %v7856
  %v8113 = vsel %vm7601, %v7345, %v7857
  %v8114 = vsel %vm7602, %v7346, %v7858
  %v8115 = vsel %vm7603, %v7347, %v7859
  %v8116 = vsel %vm7604, %v7348, %v7860
  %v8117 = vsel %vm7605, %v7349, %v7861
  %v8118 = vsel %vm7606, %v7350, %v7862
  %v8119 = vsel %vm7607, %v7351, %v7863
  %v8120 = vsel %vm7608, %v7352, %v7864
  %v8121 = vsel %vm7609, %v7353, %v7865
  %v8122 = vsel %vm7610, %v7354, %v7866
  %v8123 = vsel %vm7611, %v7355, %v7867
  %v8124 = vsel %vm7612, %v7356, %v7868
  %v8125 = vsel %vm7613, %v7357, %v7869
  %v8126 = vsel %vm7614, %v7358, %v7870
  %v8127 = vsel %vm7615, %v7359, %v7871
  %v8128 = vsel %vm7616, %v7360, %v7872
  %v8129 = vld [vmem:[%s13] sm:$0xff]
  %v8130 = vld [vmem:[%s13 + $0x8] sm:$0xff]
  %v8131 = vld [vmem:[%s13 + $0x10] sm:$0xff]
  %v8132 = vld [vmem:[%s13 + $0x18] sm:$0xff]
  %v8133 = vld [vmem:[%s13 + $0x20] sm:$0xff]
  %v8134 = vld [vmem:[%s13 + $0x28] sm:$0xff]
  %v8135 = vld [vmem:[%s13 + $0x30] sm:$0xff]
  %v8136 = vld [vmem:[%s13 + $0x38] sm:$0xff]
  %v8137 = vld [vmem:[%s13 + $0x40] sm:$0xff]
  %v8138 = vld [vmem:[%s13 + $0x48] sm:$0xff]
  %v8139 = vld [vmem:[%s13 + $0x50] sm:$0xff]
  %v8140 = vld [vmem:[%s13 + $0x58] sm:$0xff]
  %v8141 = vld [vmem:[%s13 + $0x60] sm:$0xff]
  %v8142 = vld [vmem:[%s13 + $0x68] sm:$0xff]
  %v8143 = vld [vmem:[%s13 + $0x70] sm:$0xff]
  %v8144 = vld [vmem:[%s13 + $0x78] sm:$0xff]
  %v8145 = vld [vmem:[%s13 + $0x80] sm:$0xff]
  %v8146 = vld [vmem:[%s13 + $0x88] sm:$0xff]
  %v8147 = vld [vmem:[%s13 + $0x90] sm:$0xff]
  %v8148 = vld [vmem:[%s13 + $0x98] sm:$0xff]
  %v8149 = vld [vmem:[%s13 + $0xa0] sm:$0xff]
  %v8150 = vld [vmem:[%s13 + $0xa8] sm:$0xff]
  %v8151 = vld [vmem:[%s13 + $0xb0] sm:$0xff]
  %v8152 = vld [vmem:[%s13 + $0xb8] sm:$0xff]
  %v8153 = vld [vmem:[%s13 + $0xc0] sm:$0xff]
  %v8154 = vld [vmem:[%s13 + $0xc8] sm:$0xff]
  %v8155 = vld [vmem:[%s13 + $0xd0] sm:$0xff]
  %v8156 = vld [vmem:[%s13 + $0xd8] sm:$0xff]
  %v8157 = vld [vmem:[%s13 + $0xe0] sm:$0xff]
  %v8158 = vld [vmem:[%s13 + $0xe8] sm:$0xff]
  %v8159 = vld [vmem:[%s13 + $0xf0] sm:$0xff]
  %v8160 = vld [vmem:[%s13 + $0xf8] sm:$0xff]
  %v8161 = vld [vmem:[%s13 + $0x100] sm:$0xff]
  %v8162 = vld [vmem:[%s13 + $0x108] sm:$0xff]
  %v8163 = vld [vmem:[%s13 + $0x110] sm:$0xff]
  %v8164 = vld [vmem:[%s13 + $0x118] sm:$0xff]
  %v8165 = vld [vmem:[%s13 + $0x120] sm:$0xff]
  %v8166 = vld [vmem:[%s13 + $0x128] sm:$0xff]
  %v8167 = vld [vmem:[%s13 + $0x130] sm:$0xff]
  %v8168 = vld [vmem:[%s13 + $0x138] sm:$0xff]
  %v8169 = vld [vmem:[%s13 + $0x140] sm:$0xff]
  %v8170 = vld [vmem:[%s13 + $0x148] sm:$0xff]
  %v8171 = vld [vmem:[%s13 + $0x150] sm:$0xff]
  %v8172 = vld [vmem:[%s13 + $0x158] sm:$0xff]
  %v8173 = vld [vmem:[%s13 + $0x160] sm:$0xff]
  %v8174 = vld [vmem:[%s13 + $0x168] sm:$0xff]
  %v8175 = vld [vmem:[%s13 + $0x170] sm:$0xff]
  %v8176 = vld [vmem:[%s13 + $0x178] sm:$0xff]
  %v8177 = vld [vmem:[%s13 + $0x180] sm:$0xff]
  %v8178 = vld [vmem:[%s13 + $0x188] sm:$0xff]
  %v8179 = vld [vmem:[%s13 + $0x190] sm:$0xff]
  %v8180 = vld [vmem:[%s13 + $0x198] sm:$0xff]
  %v8181 = vld [vmem:[%s13 + $0x1a0] sm:$0xff]
  %v8182 = vld [vmem:[%s13 + $0x1a8] sm:$0xff]
  %v8183 = vld [vmem:[%s13 + $0x1b0] sm:$0xff]
  %v8184 = vld [vmem:[%s13 + $0x1b8] sm:$0xff]
  %v8185 = vld [vmem:[%s13 + $0x1c0] sm:$0xff]
  %v8186 = vld [vmem:[%s13 + $0x1c8] sm:$0xff]
  %v8187 = vld [vmem:[%s13 + $0x1d0] sm:$0xff]
  %v8188 = vld [vmem:[%s13 + $0x1d8] sm:$0xff]
  %v8189 = vld [vmem:[%s13 + $0x1e0] sm:$0xff]
  %v8190 = vld [vmem:[%s13 + $0x1e8] sm:$0xff]
  %v8191 = vld [vmem:[%s13 + $0x1f0] sm:$0xff]
  %v8192 = vld [vmem:[%s13 + $0x1f8] sm:$0xff]
  %v8193 = vld [vmem:[%s13 + $0x200] sm:$0xff]
  %v8194 = vld [vmem:[%s13 + $0x208] sm:$0xff]
  %v8195 = vld [vmem:[%s13 + $0x210] sm:$0xff]
  %v8196 = vld [vmem:[%s13 + $0x218] sm:$0xff]
  %v8197 = vld [vmem:[%s13 + $0x220] sm:$0xff]
  %v8198 = vld [vmem:[%s13 + $0x228] sm:$0xff]
  %v8199 = vld [vmem:[%s13 + $0x230] sm:$0xff]
  %v8200 = vld [vmem:[%s13 + $0x238] sm:$0xff]
  %v8201 = vld [vmem:[%s13 + $0x240] sm:$0xff]
  %v8202 = vld [vmem:[%s13 + $0x248] sm:$0xff]
  %v8203 = vld [vmem:[%s13 + $0x250] sm:$0xff]
  %v8204 = vld [vmem:[%s13 + $0x258] sm:$0xff]
  %v8205 = vld [vmem:[%s13 + $0x260] sm:$0xff]
  %v8206 = vld [vmem:[%s13 + $0x268] sm:$0xff]
  %v8207 = vld [vmem:[%s13 + $0x270] sm:$0xff]
  %v8208 = vld [vmem:[%s13 + $0x278] sm:$0xff]
  %v8209 = vld [vmem:[%s13 + $0x280] sm:$0xff]
  %v8210 = vld [vmem:[%s13 + $0x288] sm:$0xff]
  %v8211 = vld [vmem:[%s13 + $0x290] sm:$0xff]
  %v8212 = vld [vmem:[%s13 + $0x298] sm:$0xff]
  %v8213 = vld [vmem:[%s13 + $0x2a0] sm:$0xff]
  %v8214 = vld [vmem:[%s13 + $0x2a8] sm:$0xff]
  %v8215 = vld [vmem:[%s13 + $0x2b0] sm:$0xff]
  %v8216 = vld [vmem:[%s13 + $0x2b8] sm:$0xff]
  %v8217 = vld [vmem:[%s13 + $0x2c0] sm:$0xff]
  %v8218 = vld [vmem:[%s13 + $0x2c8] sm:$0xff]
  %v8219 = vld [vmem:[%s13 + $0x2d0] sm:$0xff]
  %v8220 = vld [vmem:[%s13 + $0x2d8] sm:$0xff]
  %v8221 = vld [vmem:[%s13 + $0x2e0] sm:$0xff]
  %v8222 = vld [vmem:[%s13 + $0x2e8] sm:$0xff]
  %v8223 = vld [vmem:[%s13 + $0x2f0] sm:$0xff]
  %v8224 = vld [vmem:[%s13 + $0x2f8] sm:$0xff]
  %v8225 = vld [vmem:[%s13 + $0x300] sm:$0xff]
  %v8226 = vld [vmem:[%s13 + $0x308] sm:$0xff]
  %v8227 = vld [vmem:[%s13 + $0x310] sm:$0xff]
  %v8228 = vld [vmem:[%s13 + $0x318] sm:$0xff]
  %v8229 = vld [vmem:[%s13 + $0x320] sm:$0xff]
  %v8230 = vld [vmem:[%s13 + $0x328] sm:$0xff]
  %v8231 = vld [vmem:[%s13 + $0x330] sm:$0xff]
  %v8232 = vld [vmem:[%s13 + $0x338] sm:$0xff]
  %v8233 = vld [vmem:[%s13 + $0x340] sm:$0xff]
  %v8234 = vld [vmem:[%s13 + $0x348] sm:$0xff]
  %v8235 = vld [vmem:[%s13 + $0x350] sm:$0xff]
  %v8236 = vld [vmem:[%s13 + $0x358] sm:$0xff]
  %v8237 = vld [vmem:[%s13 + $0x360] sm:$0xff]
  %v8238 = vld [vmem:[%s13 + $0x368] sm:$0xff]
  %v8239 = vld [vmem:[%s13 + $0x370] sm:$0xff]
  %v8240 = vld [vmem:[%s13 + $0x378] sm:$0xff]
  %v8241 = vld [vmem:[%s13 + $0x380] sm:$0xff]
  %v8242 = vld [vmem:[%s13 + $0x388] sm:$0xff]
  %v8243 = vld [vmem:[%s13 + $0x390] sm:$0xff]
  %v8244 = vld [vmem:[%s13 + $0x398] sm:$0xff]
  %v8245 = vld [vmem:[%s13 + $0x3a0] sm:$0xff]
  %v8246 = vld [vmem:[%s13 + $0x3a8] sm:$0xff]
  %v8247 = vld [vmem:[%s13 + $0x3b0] sm:$0xff]
  %v8248 = vld [vmem:[%s13 + $0x3b8] sm:$0xff]
  %v8249 = vld [vmem:[%s13 + $0x3c0] sm:$0xff]
  %v8250 = vld [vmem:[%s13 + $0x3c8] sm:$0xff]
  %v8251 = vld [vmem:[%s13 + $0x3d0] sm:$0xff]
  %v8252 = vld [vmem:[%s13 + $0x3d8] sm:$0xff]
  %v8253 = vld [vmem:[%s13 + $0x3e0] sm:$0xff]
  %v8254 = vld [vmem:[%s13 + $0x3e8] sm:$0xff]
  %v8255 = vld [vmem:[%s13 + $0x3f0] sm:$0xff]
  %v8256 = vld [vmem:[%s13 + $0x3f8] sm:$0xff]
  %v8257 = vld [vmem:[%s13 + $0x400] sm:$0xff]
  %v8258 = vld [vmem:[%s13 + $0x408] sm:$0xff]
  %v8259 = vld [vmem:[%s13 + $0x410] sm:$0xff]
  %v8260 = vld [vmem:[%s13 + $0x418] sm:$0xff]
  %v8261 = vld [vmem:[%s13 + $0x420] sm:$0xff]
  %v8262 = vld [vmem:[%s13 + $0x428] sm:$0xff]
  %v8263 = vld [vmem:[%s13 + $0x430] sm:$0xff]
  %v8264 = vld [vmem:[%s13 + $0x438] sm:$0xff]
  %v8265 = vld [vmem:[%s13 + $0x440] sm:$0xff]
  %v8266 = vld [vmem:[%s13 + $0x448] sm:$0xff]
  %v8267 = vld [vmem:[%s13 + $0x450] sm:$0xff]
  %v8268 = vld [vmem:[%s13 + $0x458] sm:$0xff]
  %v8269 = vld [vmem:[%s13 + $0x460] sm:$0xff]
  %v8270 = vld [vmem:[%s13 + $0x468] sm:$0xff]
  %v8271 = vld [vmem:[%s13 + $0x470] sm:$0xff]
  %v8272 = vld [vmem:[%s13 + $0x478] sm:$0xff]
  %v8273 = vld [vmem:[%s13 + $0x480] sm:$0xff]
  %v8274 = vld [vmem:[%s13 + $0x488] sm:$0xff]
  %v8275 = vld [vmem:[%s13 + $0x490] sm:$0xff]
  %v8276 = vld [vmem:[%s13 + $0x498] sm:$0xff]
  %v8277 = vld [vmem:[%s13 + $0x4a0] sm:$0xff]
  %v8278 = vld [vmem:[%s13 + $0x4a8] sm:$0xff]
  %v8279 = vld [vmem:[%s13 + $0x4b0] sm:$0xff]
  %v8280 = vld [vmem:[%s13 + $0x4b8] sm:$0xff]
  %v8281 = vld [vmem:[%s13 + $0x4c0] sm:$0xff]
  %v8282 = vld [vmem:[%s13 + $0x4c8] sm:$0xff]
  %v8283 = vld [vmem:[%s13 + $0x4d0] sm:$0xff]
  %v8284 = vld [vmem:[%s13 + $0x4d8] sm:$0xff]
  %v8285 = vld [vmem:[%s13 + $0x4e0] sm:$0xff]
  %v8286 = vld [vmem:[%s13 + $0x4e8] sm:$0xff]
  %v8287 = vld [vmem:[%s13 + $0x4f0] sm:$0xff]
  %v8288 = vld [vmem:[%s13 + $0x4f8] sm:$0xff]
  %v8289 = vld [vmem:[%s13 + $0x500] sm:$0xff]
  %v8290 = vld [vmem:[%s13 + $0x508] sm:$0xff]
  %v8291 = vld [vmem:[%s13 + $0x510] sm:$0xff]
  %v8292 = vld [vmem:[%s13 + $0x518] sm:$0xff]
  %v8293 = vld [vmem:[%s13 + $0x520] sm:$0xff]
  %v8294 = vld [vmem:[%s13 + $0x528] sm:$0xff]
  %v8295 = vld [vmem:[%s13 + $0x530] sm:$0xff]
  %v8296 = vld [vmem:[%s13 + $0x538] sm:$0xff]
  %v8297 = vld [vmem:[%s13 + $0x540] sm:$0xff]
  %v8298 = vld [vmem:[%s13 + $0x548] sm:$0xff]
  %v8299 = vld [vmem:[%s13 + $0x550] sm:$0xff]
  %v8300 = vld [vmem:[%s13 + $0x558] sm:$0xff]
  %v8301 = vld [vmem:[%s13 + $0x560] sm:$0xff]
  %v8302 = vld [vmem:[%s13 + $0x568] sm:$0xff]
  %v8303 = vld [vmem:[%s13 + $0x570] sm:$0xff]
  %v8304 = vld [vmem:[%s13 + $0x578] sm:$0xff]
  %v8305 = vld [vmem:[%s13 + $0x580] sm:$0xff]
  %v8306 = vld [vmem:[%s13 + $0x588] sm:$0xff]
  %v8307 = vld [vmem:[%s13 + $0x590] sm:$0xff]
  %v8308 = vld [vmem:[%s13 + $0x598] sm:$0xff]
  %v8309 = vld [vmem:[%s13 + $0x5a0] sm:$0xff]
  %v8310 = vld [vmem:[%s13 + $0x5a8] sm:$0xff]
  %v8311 = vld [vmem:[%s13 + $0x5b0] sm:$0xff]
  %v8312 = vld [vmem:[%s13 + $0x5b8] sm:$0xff]
  %v8313 = vld [vmem:[%s13 + $0x5c0] sm:$0xff]
  %v8314 = vld [vmem:[%s13 + $0x5c8] sm:$0xff]
  %v8315 = vld [vmem:[%s13 + $0x5d0] sm:$0xff]
  %v8316 = vld [vmem:[%s13 + $0x5d8] sm:$0xff]
  %v8317 = vld [vmem:[%s13 + $0x5e0] sm:$0xff]
  %v8318 = vld [vmem:[%s13 + $0x5e8] sm:$0xff]
  %v8319 = vld [vmem:[%s13 + $0x5f0] sm:$0xff]
  %v8320 = vld [vmem:[%s13 + $0x5f8] sm:$0xff]
  %v8321 = vld [vmem:[%s13 + $0x600] sm:$0xff]
  %v8322 = vld [vmem:[%s13 + $0x608] sm:$0xff]
  %v8323 = vld [vmem:[%s13 + $0x610] sm:$0xff]
  %v8324 = vld [vmem:[%s13 + $0x618] sm:$0xff]
  %v8325 = vld [vmem:[%s13 + $0x620] sm:$0xff]
  %v8326 = vld [vmem:[%s13 + $0x628] sm:$0xff]
  %v8327 = vld [vmem:[%s13 + $0x630] sm:$0xff]
  %v8328 = vld [vmem:[%s13 + $0x638] sm:$0xff]
  %v8329 = vld [vmem:[%s13 + $0x640] sm:$0xff]
  %v8330 = vld [vmem:[%s13 + $0x648] sm:$0xff]
  %v8331 = vld [vmem:[%s13 + $0x650] sm:$0xff]
  %v8332 = vld [vmem:[%s13 + $0x658] sm:$0xff]
  %v8333 = vld [vmem:[%s13 + $0x660] sm:$0xff]
  %v8334 = vld [vmem:[%s13 + $0x668] sm:$0xff]
  %v8335 = vld [vmem:[%s13 + $0x670] sm:$0xff]
  %v8336 = vld [vmem:[%s13 + $0x678] sm:$0xff]
  %v8337 = vld [vmem:[%s13 + $0x680] sm:$0xff]
  %v8338 = vld [vmem:[%s13 + $0x688] sm:$0xff]
  %v8339 = vld [vmem:[%s13 + $0x690] sm:$0xff]
  %v8340 = vld [vmem:[%s13 + $0x698] sm:$0xff]
  %v8341 = vld [vmem:[%s13 + $0x6a0] sm:$0xff]
  %v8342 = vld [vmem:[%s13 + $0x6a8] sm:$0xff]
  %v8343 = vld [vmem:[%s13 + $0x6b0] sm:$0xff]
  %v8344 = vld [vmem:[%s13 + $0x6b8] sm:$0xff]
  %v8345 = vld [vmem:[%s13 + $0x6c0] sm:$0xff]
  %v8346 = vld [vmem:[%s13 + $0x6c8] sm:$0xff]
  %v8347 = vld [vmem:[%s13 + $0x6d0] sm:$0xff]
  %v8348 = vld [vmem:[%s13 + $0x6d8] sm:$0xff]
  %v8349 = vld [vmem:[%s13 + $0x6e0] sm:$0xff]
  %v8350 = vld [vmem:[%s13 + $0x6e8] sm:$0xff]
  %v8351 = vld [vmem:[%s13 + $0x6f0] sm:$0xff]
  %v8352 = vld [vmem:[%s13 + $0x6f8] sm:$0xff]
  %v8353 = vunpack.c.l.s8.bf16 %v8129
  %v8354 = vunpack.c.l.s8.bf16 %v8130
  %v8355 = vunpack.c.l.s8.bf16 %v8131
  %v8356 = vunpack.c.l.s8.bf16 %v8132
  %v8357 = vunpack.c.l.s8.bf16 %v8133
  %v8358 = vunpack.c.l.s8.bf16 %v8134
  %v8359 = vunpack.c.l.s8.bf16 %v8135
  %v8360 = vunpack.c.h.s8.bf16 %v8129
  %v8361 = vunpack.c.h.s8.bf16 %v8130
  %v8362 = vunpack.c.h.s8.bf16 %v8131
  %v8363 = vunpack.c.h.s8.bf16 %v8132
  %v8364 = vunpack.c.h.s8.bf16 %v8133
  %v8365 = vunpack.c.h.s8.bf16 %v8134
  %v8366 = vunpack.c.h.s8.bf16 %v8135
  %v8367 = vunpack.c.l.s8.bf16 %v8136
  %v8368 = vunpack.c.l.s8.bf16 %v8137
  %v8369 = vunpack.c.l.s8.bf16 %v8138
  %v8370 = vunpack.c.l.s8.bf16 %v8139
  %v8371 = vunpack.c.l.s8.bf16 %v8140
  %v8372 = vunpack.c.l.s8.bf16 %v8141
  %v8373 = vunpack.c.l.s8.bf16 %v8142
  %v8374 = vunpack.c.h.s8.bf16 %v8136
  %v8375 = vunpack.c.h.s8.bf16 %v8137
  %v8376 = vunpack.c.h.s8.bf16 %v8138
  %v8377 = vunpack.c.h.s8.bf16 %v8139
  %v8378 = vunpack.c.h.s8.bf16 %v8140
  %v8379 = vunpack.c.h.s8.bf16 %v8141
  %v8380 = vunpack.c.h.s8.bf16 %v8142
  %v8381 = vunpack.c.l.s8.bf16 %v8143
  %v8382 = vunpack.c.l.s8.bf16 %v8144
  %v8383 = vunpack.c.l.s8.bf16 %v8145
  %v8384 = vunpack.c.l.s8.bf16 %v8146
  %v8385 = vunpack.c.l.s8.bf16 %v8147
  %v8386 = vunpack.c.l.s8.bf16 %v8148
  %v8387 = vunpack.c.l.s8.bf16 %v8149
  %v8388 = vunpack.c.h.s8.bf16 %v8143
  %v8389 = vunpack.c.h.s8.bf16 %v8144
  %v8390 = vunpack.c.h.s8.bf16 %v8145
  %v8391 = vunpack.c.h.s8.bf16 %v8146
  %v8392 = vunpack.c.h.s8.bf16 %v8147
  %v8393 = vunpack.c.h.s8.bf16 %v8148
  %v8394 = vunpack.c.h.s8.bf16 %v8149
  %v8395 = vunpack.c.l.s8.bf16 %v8150
  %v8396 = vunpack.c.l.s8.bf16 %v8151
  %v8397 = vunpack.c.l.s8.bf16 %v8152
  %v8398 = vunpack.c.l.s8.bf16 %v8153
  %v8399 = vunpack.c.l.s8.bf16 %v8154
  %v8400 = vunpack.c.l.s8.bf16 %v8155
  %v8401 = vunpack.c.l.s8.bf16 %v8156
  %v8402 = vunpack.c.h.s8.bf16 %v8150
  %v8403 = vunpack.c.h.s8.bf16 %v8151
  %v8404 = vunpack.c.h.s8.bf16 %v8152
  %v8405 = vunpack.c.h.s8.bf16 %v8153
  %v8406 = vunpack.c.h.s8.bf16 %v8154
  %v8407 = vunpack.c.h.s8.bf16 %v8155
  %v8408 = vunpack.c.h.s8.bf16 %v8156
  %v8409 = vunpack.c.l.s8.bf16 %v8157
  %v8410 = vunpack.c.l.s8.bf16 %v8158
  %v8411 = vunpack.c.l.s8.bf16 %v8159
  %v8412 = vunpack.c.l.s8.bf16 %v8160
  %v8413 = vunpack.c.l.s8.bf16 %v8161
  %v8414 = vunpack.c.l.s8.bf16 %v8162
  %v8415 = vunpack.c.l.s8.bf16 %v8163
  %v8416 = vunpack.c.h.s8.bf16 %v8157
  %v8417 = vunpack.c.h.s8.bf16 %v8158
  %v8418 = vunpack.c.h.s8.bf16 %v8159
  %v8419 = vunpack.c.h.s8.bf16 %v8160
  %v8420 = vunpack.c.h.s8.bf16 %v8161
  %v8421 = vunpack.c.h.s8.bf16 %v8162
  %v8422 = vunpack.c.h.s8.bf16 %v8163
  %v8423 = vunpack.c.l.s8.bf16 %v8164
  %v8424 = vunpack.c.l.s8.bf16 %v8165
  %v8425 = vunpack.c.l.s8.bf16 %v8166
  %v8426 = vunpack.c.l.s8.bf16 %v8167
  %v8427 = vunpack.c.l.s8.bf16 %v8168
  %v8428 = vunpack.c.l.s8.bf16 %v8169
  %v8429 = vunpack.c.l.s8.bf16 %v8170
  %v8430 = vunpack.c.h.s8.bf16 %v8164
  %v8431 = vunpack.c.h.s8.bf16 %v8165
  %v8432 = vunpack.c.h.s8.bf16 %v8166
  %v8433 = vunpack.c.h.s8.bf16 %v8167
  %v8434 = vunpack.c.h.s8.bf16 %v8168
  %v8435 = vunpack.c.h.s8.bf16 %v8169
  %v8436 = vunpack.c.h.s8.bf16 %v8170
  %v8437 = vunpack.c.l.s8.bf16 %v8171
  %v8438 = vunpack.c.l.s8.bf16 %v8172
  %v8439 = vunpack.c.l.s8.bf16 %v8173
  %v8440 = vunpack.c.l.s8.bf16 %v8174
  %v8441 = vunpack.c.l.s8.bf16 %v8175
  %v8442 = vunpack.c.l.s8.bf16 %v8176
  %v8443 = vunpack.c.l.s8.bf16 %v8177
  %v8444 = vunpack.c.h.s8.bf16 %v8171
  %v8445 = vunpack.c.h.s8.bf16 %v8172
  %v8446 = vunpack.c.h.s8.bf16 %v8173
  %v8447 = vunpack.c.h.s8.bf16 %v8174
  %v8448 = vunpack.c.h.s8.bf16 %v8175
  %v8449 = vunpack.c.h.s8.bf16 %v8176
  %v8450 = vunpack.c.h.s8.bf16 %v8177
  %v8451 = vunpack.c.l.s8.bf16 %v8178
  %v8452 = vunpack.c.l.s8.bf16 %v8179
  %v8453 = vunpack.c.l.s8.bf16 %v8180
  %v8454 = vunpack.c.l.s8.bf16 %v8181
  %v8455 = vunpack.c.l.s8.bf16 %v8182
  %v8456 = vunpack.c.l.s8.bf16 %v8183
  %v8457 = vunpack.c.l.s8.bf16 %v8184
  %v8458 = vunpack.c.h.s8.bf16 %v8178
  %v8459 = vunpack.c.h.s8.bf16 %v8179
  %v8460 = vunpack.c.h.s8.bf16 %v8180
  %v8461 = vunpack.c.h.s8.bf16 %v8181
  %v8462 = vunpack.c.h.s8.bf16 %v8182
  %v8463 = vunpack.c.h.s8.bf16 %v8183
  %v8464 = vunpack.c.h.s8.bf16 %v8184
  %v8465 = vunpack.c.l.s8.bf16 %v8185
  %v8466 = vunpack.c.l.s8.bf16 %v8186
  %v8467 = vunpack.c.l.s8.bf16 %v8187
  %v8468 = vunpack.c.l.s8.bf16 %v8188
  %v8469 = vunpack.c.l.s8.bf16 %v8189
  %v8470 = vunpack.c.l.s8.bf16 %v8190
  %v8471 = vunpack.c.l.s8.bf16 %v8191
  %v8472 = vunpack.c.h.s8.bf16 %v8185
  %v8473 = vunpack.c.h.s8.bf16 %v8186
  %v8474 = vunpack.c.h.s8.bf16 %v8187
  %v8475 = vunpack.c.h.s8.bf16 %v8188
  %v8476 = vunpack.c.h.s8.bf16 %v8189
  %v8477 = vunpack.c.h.s8.bf16 %v8190
  %v8478 = vunpack.c.h.s8.bf16 %v8191
  %v8479 = vunpack.c.l.s8.bf16 %v8192
  %v8480 = vunpack.c.l.s8.bf16 %v8193
  %v8481 = vunpack.c.l.s8.bf16 %v8194
  %v8482 = vunpack.c.l.s8.bf16 %v8195
  %v8483 = vunpack.c.l.s8.bf16 %v8196
  %v8484 = vunpack.c.l.s8.bf16 %v8197
  %v8485 = vunpack.c.l.s8.bf16 %v8198
  %v8486 = vunpack.c.h.s8.bf16 %v8192
  %v8487 = vunpack.c.h.s8.bf16 %v8193
  %v8488 = vunpack.c.h.s8.bf16 %v8194
  %v8489 = vunpack.c.h.s8.bf16 %v8195
  %v8490 = vunpack.c.h.s8.bf16 %v8196
  %v8491 = vunpack.c.h.s8.bf16 %v8197
  %v8492 = vunpack.c.h.s8.bf16 %v8198
  %v8493 = vunpack.c.l.s8.bf16 %v8199
  %v8494 = vunpack.c.l.s8.bf16 %v8200
  %v8495 = vunpack.c.l.s8.bf16 %v8201
  %v8496 = vunpack.c.l.s8.bf16 %v8202
  %v8497 = vunpack.c.l.s8.bf16 %v8203
  %v8498 = vunpack.c.l.s8.bf16 %v8204
  %v8499 = vunpack.c.l.s8.bf16 %v8205
  %v8500 = vunpack.c.h.s8.bf16 %v8199
  %v8501 = vunpack.c.h.s8.bf16 %v8200
  %v8502 = vunpack.c.h.s8.bf16 %v8201
  %v8503 = vunpack.c.h.s8.bf16 %v8202
  %v8504 = vunpack.c.h.s8.bf16 %v8203
  %v8505 = vunpack.c.h.s8.bf16 %v8204
  %v8506 = vunpack.c.h.s8.bf16 %v8205
  %v8507 = vunpack.c.l.s8.bf16 %v8206
  %v8508 = vunpack.c.l.s8.bf16 %v8207
  %v8509 = vunpack.c.l.s8.bf16 %v8208
  %v8510 = vunpack.c.l.s8.bf16 %v8209
  %v8511 = vunpack.c.l.s8.bf16 %v8210
  %v8512 = vunpack.c.l.s8.bf16 %v8211
  %v8513 = vunpack.c.l.s8.bf16 %v8212
  %v8514 = vunpack.c.h.s8.bf16 %v8206
  %v8515 = vunpack.c.h.s8.bf16 %v8207
  %v8516 = vunpack.c.h.s8.bf16 %v8208
  %v8517 = vunpack.c.h.s8.bf16 %v8209
  %v8518 = vunpack.c.h.s8.bf16 %v8210
  %v8519 = vunpack.c.h.s8.bf16 %v8211
  %v8520 = vunpack.c.h.s8.bf16 %v8212
  %v8521 = vunpack.c.l.s8.bf16 %v8213
  %v8522 = vunpack.c.l.s8.bf16 %v8214
  %v8523 = vunpack.c.l.s8.bf16 %v8215
  %v8524 = vunpack.c.l.s8.bf16 %v8216
  %v8525 = vunpack.c.l.s8.bf16 %v8217
  %v8526 = vunpack.c.l.s8.bf16 %v8218
  %v8527 = vunpack.c.l.s8.bf16 %v8219
  %v8528 = vunpack.c.h.s8.bf16 %v8213
  %v8529 = vunpack.c.h.s8.bf16 %v8214
  %v8530 = vunpack.c.h.s8.bf16 %v8215
  %v8531 = vunpack.c.h.s8.bf16 %v8216
  %v8532 = vunpack.c.h.s8.bf16 %v8217
  %v8533 = vunpack.c.h.s8.bf16 %v8218
  %v8534 = vunpack.c.h.s8.bf16 %v8219
  %v8535 = vunpack.c.l.s8.bf16 %v8220
  %v8536 = vunpack.c.l.s8.bf16 %v8221
  %v8537 = vunpack.c.l.s8.bf16 %v8222
  %v8538 = vunpack.c.l.s8.bf16 %v8223
  %v8539 = vunpack.c.l.s8.bf16 %v8224
  %v8540 = vunpack.c.l.s8.bf16 %v8225
  %v8541 = vunpack.c.l.s8.bf16 %v8226
  %v8542 = vunpack.c.h.s8.bf16 %v8220
  %v8543 = vunpack.c.h.s8.bf16 %v8221
  %v8544 = vunpack.c.h.s8.bf16 %v8222
  %v8545 = vunpack.c.h.s8.bf16 %v8223
  %v8546 = vunpack.c.h.s8.bf16 %v8224
  %v8547 = vunpack.c.h.s8.bf16 %v8225
  %v8548 = vunpack.c.h.s8.bf16 %v8226
  %v8549 = vunpack.c.l.s8.bf16 %v8227
  %v8550 = vunpack.c.l.s8.bf16 %v8228
  %v8551 = vunpack.c.l.s8.bf16 %v8229
  %v8552 = vunpack.c.l.s8.bf16 %v8230
  %v8553 = vunpack.c.l.s8.bf16 %v8231
  %v8554 = vunpack.c.l.s8.bf16 %v8232
  %v8555 = vunpack.c.l.s8.bf16 %v8233
  %v8556 = vunpack.c.h.s8.bf16 %v8227
  %v8557 = vunpack.c.h.s8.bf16 %v8228
  %v8558 = vunpack.c.h.s8.bf16 %v8229
  %v8559 = vunpack.c.h.s8.bf16 %v8230
  %v8560 = vunpack.c.h.s8.bf16 %v8231
  %v8561 = vunpack.c.h.s8.bf16 %v8232
  %v8562 = vunpack.c.h.s8.bf16 %v8233
  %v8563 = vunpack.c.l.s8.bf16 %v8234
  %v8564 = vunpack.c.l.s8.bf16 %v8235
  %v8565 = vunpack.c.l.s8.bf16 %v8236
  %v8566 = vunpack.c.l.s8.bf16 %v8237
  %v8567 = vunpack.c.l.s8.bf16 %v8238
  %v8568 = vunpack.c.l.s8.bf16 %v8239
  %v8569 = vunpack.c.l.s8.bf16 %v8240
  %v8570 = vunpack.c.h.s8.bf16 %v8234
  %v8571 = vunpack.c.h.s8.bf16 %v8235
  %v8572 = vunpack.c.h.s8.bf16 %v8236
  %v8573 = vunpack.c.h.s8.bf16 %v8237
  %v8574 = vunpack.c.h.s8.bf16 %v8238
  %v8575 = vunpack.c.h.s8.bf16 %v8239
  %v8576 = vunpack.c.h.s8.bf16 %v8240
  %v8577 = vunpack.c.l.s8.bf16 %v8241
  %v8578 = vunpack.c.l.s8.bf16 %v8242
  %v8579 = vunpack.c.l.s8.bf16 %v8243
  %v8580 = vunpack.c.l.s8.bf16 %v8244
  %v8581 = vunpack.c.l.s8.bf16 %v8245
  %v8582 = vunpack.c.l.s8.bf16 %v8246
  %v8583 = vunpack.c.l.s8.bf16 %v8247
  %v8584 = vunpack.c.h.s8.bf16 %v8241
  %v8585 = vunpack.c.h.s8.bf16 %v8242
  %v8586 = vunpack.c.h.s8.bf16 %v8243
  %v8587 = vunpack.c.h.s8.bf16 %v8244
  %v8588 = vunpack.c.h.s8.bf16 %v8245
  %v8589 = vunpack.c.h.s8.bf16 %v8246
  %v8590 = vunpack.c.h.s8.bf16 %v8247
  %v8591 = vunpack.c.l.s8.bf16 %v8248
  %v8592 = vunpack.c.l.s8.bf16 %v8249
  %v8593 = vunpack.c.l.s8.bf16 %v8250
  %v8594 = vunpack.c.l.s8.bf16 %v8251
  %v8595 = vunpack.c.l.s8.bf16 %v8252
  %v8596 = vunpack.c.l.s8.bf16 %v8253
  %v8597 = vunpack.c.l.s8.bf16 %v8254
  %v8598 = vunpack.c.h.s8.bf16 %v8248
  %v8599 = vunpack.c.h.s8.bf16 %v8249
  %v8600 = vunpack.c.h.s8.bf16 %v8250
  %v8601 = vunpack.c.h.s8.bf16 %v8251
  %v8602 = vunpack.c.h.s8.bf16 %v8252
  %v8603 = vunpack.c.h.s8.bf16 %v8253
  %v8604 = vunpack.c.h.s8.bf16 %v8254
  %v8605 = vunpack.c.l.s8.bf16 %v8255
  %v8606 = vunpack.c.l.s8.bf16 %v8256
  %v8607 = vunpack.c.l.s8.bf16 %v8257
  %v8608 = vunpack.c.l.s8.bf16 %v8258
  %v8609 = vunpack.c.l.s8.bf16 %v8259
  %v8610 = vunpack.c.l.s8.bf16 %v8260
  %v8611 = vunpack.c.l.s8.bf16 %v8261
  %v8612 = vunpack.c.h.s8.bf16 %v8255
  %v8613 = vunpack.c.h.s8.bf16 %v8256
  %v8614 = vunpack.c.h.s8.bf16 %v8257
  %v8615 = vunpack.c.h.s8.bf16 %v8258
  %v8616 = vunpack.c.h.s8.bf16 %v8259
  %v8617 = vunpack.c.h.s8.bf16 %v8260
  %v8618 = vunpack.c.h.s8.bf16 %v8261
  %v8619 = vunpack.c.l.s8.bf16 %v8262
  %v8620 = vunpack.c.l.s8.bf16 %v8263
  %v8621 = vunpack.c.l.s8.bf16 %v8264
  %v8622 = vunpack.c.l.s8.bf16 %v8265
  %v8623 = vunpack.c.l.s8.bf16 %v8266
  %v8624 = vunpack.c.l.s8.bf16 %v8267
  %v8625 = vunpack.c.l.s8.bf16 %v8268
  %v8626 = vunpack.c.h.s8.bf16 %v8262
  %v8627 = vunpack.c.h.s8.bf16 %v8263
  %v8628 = vunpack.c.h.s8.bf16 %v8264
  %v8629 = vunpack.c.h.s8.bf16 %v8265
  %v8630 = vunpack.c.h.s8.bf16 %v8266
  %v8631 = vunpack.c.h.s8.bf16 %v8267
  %v8632 = vunpack.c.h.s8.bf16 %v8268
  %v8633 = vunpack.c.l.s8.bf16 %v8269
  %v8634 = vunpack.c.l.s8.bf16 %v8270
  %v8635 = vunpack.c.l.s8.bf16 %v8271
  %v8636 = vunpack.c.l.s8.bf16 %v8272
  %v8637 = vunpack.c.l.s8.bf16 %v8273
  %v8638 = vunpack.c.l.s8.bf16 %v8274
  %v8639 = vunpack.c.l.s8.bf16 %v8275
  %v8640 = vunpack.c.h.s8.bf16 %v8269
  %v8641 = vunpack.c.h.s8.bf16 %v8270
  %v8642 = vunpack.c.h.s8.bf16 %v8271
  %v8643 = vunpack.c.h.s8.bf16 %v8272
  %v8644 = vunpack.c.h.s8.bf16 %v8273
  %v8645 = vunpack.c.h.s8.bf16 %v8274
  %v8646 = vunpack.c.h.s8.bf16 %v8275
  %v8647 = vunpack.c.l.s8.bf16 %v8276
  %v8648 = vunpack.c.l.s8.bf16 %v8277
  %v8649 = vunpack.c.l.s8.bf16 %v8278
  %v8650 = vunpack.c.l.s8.bf16 %v8279
  %v8651 = vunpack.c.l.s8.bf16 %v8280
  %v8652 = vunpack.c.l.s8.bf16 %v8281
  %v8653 = vunpack.c.l.s8.bf16 %v8282
  %v8654 = vunpack.c.h.s8.bf16 %v8276
  %v8655 = vunpack.c.h.s8.bf16 %v8277
  %v8656 = vunpack.c.h.s8.bf16 %v8278
  %v8657 = vunpack.c.h.s8.bf16 %v8279
  %v8658 = vunpack.c.h.s8.bf16 %v8280
  %v8659 = vunpack.c.h.s8.bf16 %v8281
  %v8660 = vunpack.c.h.s8.bf16 %v8282
  %v8661 = vunpack.c.l.s8.bf16 %v8283
  %v8662 = vunpack.c.l.s8.bf16 %v8284
  %v8663 = vunpack.c.l.s8.bf16 %v8285
  %v8664 = vunpack.c.l.s8.bf16 %v8286
  %v8665 = vunpack.c.l.s8.bf16 %v8287
  %v8666 = vunpack.c.l.s8.bf16 %v8288
  %v8667 = vunpack.c.l.s8.bf16 %v8289
  %v8668 = vunpack.c.h.s8.bf16 %v8283
  %v8669 = vunpack.c.h.s8.bf16 %v8284
  %v8670 = vunpack.c.h.s8.bf16 %v8285
  %v8671 = vunpack.c.h.s8.bf16 %v8286
  %v8672 = vunpack.c.h.s8.bf16 %v8287
  %v8673 = vunpack.c.h.s8.bf16 %v8288
  %v8674 = vunpack.c.h.s8.bf16 %v8289
  %v8675 = vunpack.c.l.s8.bf16 %v8290
  %v8676 = vunpack.c.l.s8.bf16 %v8291
  %v8677 = vunpack.c.l.s8.bf16 %v8292
  %v8678 = vunpack.c.l.s8.bf16 %v8293
  %v8679 = vunpack.c.l.s8.bf16 %v8294
  %v8680 = vunpack.c.l.s8.bf16 %v8295
  %v8681 = vunpack.c.l.s8.bf16 %v8296
  %v8682 = vunpack.c.h.s8.bf16 %v8290
  %v8683 = vunpack.c.h.s8.bf16 %v8291
  %v8684 = vunpack.c.h.s8.bf16 %v8292
  %v8685 = vunpack.c.h.s8.bf16 %v8293
  %v8686 = vunpack.c.h.s8.bf16 %v8294
  %v8687 = vunpack.c.h.s8.bf16 %v8295
  %v8688 = vunpack.c.h.s8.bf16 %v8296
  %v8689 = vunpack.c.l.s8.bf16 %v8297
  %v8690 = vunpack.c.l.s8.bf16 %v8298
  %v8691 = vunpack.c.l.s8.bf16 %v8299
  %v8692 = vunpack.c.l.s8.bf16 %v8300
  %v8693 = vunpack.c.l.s8.bf16 %v8301
  %v8694 = vunpack.c.l.s8.bf16 %v8302
  %v8695 = vunpack.c.l.s8.bf16 %v8303
  %v8696 = vunpack.c.h.s8.bf16 %v8297
  %v8697 = vunpack.c.h.s8.bf16 %v8298
  %v8698 = vunpack.c.h.s8.bf16 %v8299
  %v8699 = vunpack.c.h.s8.bf16 %v8300
  %v8700 = vunpack.c.h.s8.bf16 %v8301
  %v8701 = vunpack.c.h.s8.bf16 %v8302
  %v8702 = vunpack.c.h.s8.bf16 %v8303
  %v8703 = vunpack.c.l.s8.bf16 %v8304
  %v8704 = vunpack.c.l.s8.bf16 %v8305
  %v8705 = vunpack.c.l.s8.bf16 %v8306
  %v8706 = vunpack.c.l.s8.bf16 %v8307
  %v8707 = vunpack.c.l.s8.bf16 %v8308
  %v8708 = vunpack.c.l.s8.bf16 %v8309
  %v8709 = vunpack.c.l.s8.bf16 %v8310
  %v8710 = vunpack.c.h.s8.bf16 %v8304
  %v8711 = vunpack.c.h.s8.bf16 %v8305
  %v8712 = vunpack.c.h.s8.bf16 %v8306
  %v8713 = vunpack.c.h.s8.bf16 %v8307
  %v8714 = vunpack.c.h.s8.bf16 %v8308
  %v8715 = vunpack.c.h.s8.bf16 %v8309
  %v8716 = vunpack.c.h.s8.bf16 %v8310
  %v8717 = vunpack.c.l.s8.bf16 %v8311
  %v8718 = vunpack.c.l.s8.bf16 %v8312
  %v8719 = vunpack.c.l.s8.bf16 %v8313
  %v8720 = vunpack.c.l.s8.bf16 %v8314
  %v8721 = vunpack.c.l.s8.bf16 %v8315
  %v8722 = vunpack.c.l.s8.bf16 %v8316
  %v8723 = vunpack.c.l.s8.bf16 %v8317
  %v8724 = vunpack.c.h.s8.bf16 %v8311
  %v8725 = vunpack.c.h.s8.bf16 %v8312
  %v8726 = vunpack.c.h.s8.bf16 %v8313
  %v8727 = vunpack.c.h.s8.bf16 %v8314
  %v8728 = vunpack.c.h.s8.bf16 %v8315
  %v8729 = vunpack.c.h.s8.bf16 %v8316
  %v8730 = vunpack.c.h.s8.bf16 %v8317
  %v8731 = vunpack.c.l.s8.bf16 %v8318
  %v8732 = vunpack.c.l.s8.bf16 %v8319
  %v8733 = vunpack.c.l.s8.bf16 %v8320
  %v8734 = vunpack.c.l.s8.bf16 %v8321
  %v8735 = vunpack.c.l.s8.bf16 %v8322
  %v8736 = vunpack.c.l.s8.bf16 %v8323
  %v8737 = vunpack.c.l.s8.bf16 %v8324
  %v8738 = vunpack.c.h.s8.bf16 %v8318
  %v8739 = vunpack.c.h.s8.bf16 %v8319
  %v8740 = vunpack.c.h.s8.bf16 %v8320
  %v8741 = vunpack.c.h.s8.bf16 %v8321
  %v8742 = vunpack.c.h.s8.bf16 %v8322
  %v8743 = vunpack.c.h.s8.bf16 %v8323
  %v8744 = vunpack.c.h.s8.bf16 %v8324
  %v8745 = vunpack.c.l.s8.bf16 %v8325
  %v8746 = vunpack.c.l.s8.bf16 %v8326
  %v8747 = vunpack.c.l.s8.bf16 %v8327
  %v8748 = vunpack.c.l.s8.bf16 %v8328
  %v8749 = vunpack.c.l.s8.bf16 %v8329
  %v8750 = vunpack.c.l.s8.bf16 %v8330
  %v8751 = vunpack.c.l.s8.bf16 %v8331
  %v8752 = vunpack.c.h.s8.bf16 %v8325
  %v8753 = vunpack.c.h.s8.bf16 %v8326
  %v8754 = vunpack.c.h.s8.bf16 %v8327
  %v8755 = vunpack.c.h.s8.bf16 %v8328
  %v8756 = vunpack.c.h.s8.bf16 %v8329
  %v8757 = vunpack.c.h.s8.bf16 %v8330
  %v8758 = vunpack.c.h.s8.bf16 %v8331
  %v8759 = vunpack.c.l.s8.bf16 %v8332
  %v8760 = vunpack.c.l.s8.bf16 %v8333
  %v8761 = vunpack.c.l.s8.bf16 %v8334
  %v8762 = vunpack.c.l.s8.bf16 %v8335
  %v8763 = vunpack.c.l.s8.bf16 %v8336
  %v8764 = vunpack.c.l.s8.bf16 %v8337
  %v8765 = vunpack.c.l.s8.bf16 %v8338
  %v8766 = vunpack.c.h.s8.bf16 %v8332
  %v8767 = vunpack.c.h.s8.bf16 %v8333
  %v8768 = vunpack.c.h.s8.bf16 %v8334
  %v8769 = vunpack.c.h.s8.bf16 %v8335
  %v8770 = vunpack.c.h.s8.bf16 %v8336
  %v8771 = vunpack.c.h.s8.bf16 %v8337
  %v8772 = vunpack.c.h.s8.bf16 %v8338
  %v8773 = vunpack.c.l.s8.bf16 %v8339
  %v8774 = vunpack.c.l.s8.bf16 %v8340
  %v8775 = vunpack.c.l.s8.bf16 %v8341
  %v8776 = vunpack.c.l.s8.bf16 %v8342
  %v8777 = vunpack.c.l.s8.bf16 %v8343
  %v8778 = vunpack.c.l.s8.bf16 %v8344
  %v8779 = vunpack.c.l.s8.bf16 %v8345
  %v8780 = vunpack.c.h.s8.bf16 %v8339
  %v8781 = vunpack.c.h.s8.bf16 %v8340
  %v8782 = vunpack.c.h.s8.bf16 %v8341
  %v8783 = vunpack.c.h.s8.bf16 %v8342
  %v8784 = vunpack.c.h.s8.bf16 %v8343
  %v8785 = vunpack.c.h.s8.bf16 %v8344
  %v8786 = vunpack.c.h.s8.bf16 %v8345
  %v8787 = vunpack.c.l.s8.bf16 %v8346
  %v8788 = vunpack.c.l.s8.bf16 %v8347
  %v8789 = vunpack.c.l.s8.bf16 %v8348
  %v8790 = vunpack.c.l.s8.bf16 %v8349
  %v8791 = vunpack.c.l.s8.bf16 %v8350
  %v8792 = vunpack.c.l.s8.bf16 %v8351
  %v8793 = vunpack.c.l.s8.bf16 %v8352
  %v8794 = vunpack.c.h.s8.bf16 %v8346
  %v8795 = vunpack.c.h.s8.bf16 %v8347
  %v8796 = vunpack.c.h.s8.bf16 %v8348
  %v8797 = vunpack.c.h.s8.bf16 %v8349
  %v8798 = vunpack.c.h.s8.bf16 %v8350
  %v8799 = vunpack.c.h.s8.bf16 %v8351
  %v8800 = vunpack.c.h.s8.bf16 %v8352
  %v8801 = vpack.c.bf16 %v7881, %v7873
  %v8802 = vpack.c.bf16 %v7882, %v7874
  %v8803 = vpack.c.bf16 %v7883, %v7875
  %v8804 = vpack.c.bf16 %v7884, %v7876
  %v8805 = vpack.c.bf16 %v7885, %v7877
  %v8806 = vpack.c.bf16 %v7886, %v7878
  %v8807 = vpack.c.bf16 %v7887, %v7879
  %v8808 = vpack.c.bf16 %v7888, %v7880
  %v8809 = vpack.c.bf16 %v7897, %v7889
  %v8810 = vpack.c.bf16 %v7898, %v7890
  %v8811 = vpack.c.bf16 %v7899, %v7891
  %v8812 = vpack.c.bf16 %v7900, %v7892
  %v8813 = vpack.c.bf16 %v7901, %v7893
  %v8814 = vpack.c.bf16 %v7902, %v7894
  %v8815 = vpack.c.bf16 %v7903, %v7895
  %v8816 = vpack.c.bf16 %v7904, %v7896
  %v8817 = vpack.c.bf16 %v7913, %v7905
  %v8818 = vpack.c.bf16 %v7914, %v7906
  %v8819 = vpack.c.bf16 %v7915, %v7907
  %v8820 = vpack.c.bf16 %v7916, %v7908
  %v8821 = vpack.c.bf16 %v7917, %v7909
  %v8822 = vpack.c.bf16 %v7918, %v7910
  %v8823 = vpack.c.bf16 %v7919, %v7911
  %v8824 = vpack.c.bf16 %v7920, %v7912
  %v8825 = vpack.c.bf16 %v7929, %v7921
  %v8826 = vpack.c.bf16 %v7930, %v7922
  %v8827 = vpack.c.bf16 %v7931, %v7923
  %v8828 = vpack.c.bf16 %v7932, %v7924
  %v8829 = vpack.c.bf16 %v7933, %v7925
  %v8830 = vpack.c.bf16 %v7934, %v7926
  %v8831 = vpack.c.bf16 %v7935, %v7927
  %v8832 = vpack.c.bf16 %v7936, %v7928
  %v8833 = vpack.c.bf16 %v7945, %v7937
  %v8834 = vpack.c.bf16 %v7946, %v7938
  %v8835 = vpack.c.bf16 %v7947, %v7939
  %v8836 = vpack.c.bf16 %v7948, %v7940
  %v8837 = vpack.c.bf16 %v7949, %v7941
  %v8838 = vpack.c.bf16 %v7950, %v7942
  %v8839 = vpack.c.bf16 %v7951, %v7943
  %v8840 = vpack.c.bf16 %v7952, %v7944
  %v8841 = vpack.c.bf16 %v7961, %v7953
  %v8842 = vpack.c.bf16 %v7962, %v7954
  %v8843 = vpack.c.bf16 %v7963, %v7955
  %v8844 = vpack.c.bf16 %v7964, %v7956
  %v8845 = vpack.c.bf16 %v7965, %v7957
  %v8846 = vpack.c.bf16 %v7966, %v7958
  %v8847 = vpack.c.bf16 %v7967, %v7959
  %v8848 = vpack.c.bf16 %v7968, %v7960
  %v8849 = vpack.c.bf16 %v7977, %v7969
  %v8850 = vpack.c.bf16 %v7978, %v7970
  %v8851 = vpack.c.bf16 %v7979, %v7971
  %v8852 = vpack.c.bf16 %v7980, %v7972
  %v8853 = vpack.c.bf16 %v7981, %v7973
  %v8854 = vpack.c.bf16 %v7982, %v7974
  %v8855 = vpack.c.bf16 %v7983, %v7975
  %v8856 = vpack.c.bf16 %v7984, %v7976
  %v8857 = vpack.c.bf16 %v7993, %v7985
  %v8858 = vpack.c.bf16 %v7994, %v7986
  %v8859 = vpack.c.bf16 %v7995, %v7987
  %v8860 = vpack.c.bf16 %v7996, %v7988
  %v8861 = vpack.c.bf16 %v7997, %v7989
  %v8862 = vpack.c.bf16 %v7998, %v7990
  %v8863 = vpack.c.bf16 %v7999, %v7991
  %v8864 = vpack.c.bf16 %v8000, %v7992
  %v8865 = vpack.c.bf16 %v8009, %v8001
  %v8866 = vpack.c.bf16 %v8010, %v8002
  %v8867 = vpack.c.bf16 %v8011, %v8003
  %v8868 = vpack.c.bf16 %v8012, %v8004
  %v8869 = vpack.c.bf16 %v8013, %v8005
  %v8870 = vpack.c.bf16 %v8014, %v8006
  %v8871 = vpack.c.bf16 %v8015, %v8007
  %v8872 = vpack.c.bf16 %v8016, %v8008
  %v8873 = vpack.c.bf16 %v8025, %v8017
  %v8874 = vpack.c.bf16 %v8026, %v8018
  %v8875 = vpack.c.bf16 %v8027, %v8019
  %v8876 = vpack.c.bf16 %v8028, %v8020
  %v8877 = vpack.c.bf16 %v8029, %v8021
  %v8878 = vpack.c.bf16 %v8030, %v8022
  %v8879 = vpack.c.bf16 %v8031, %v8023
  %v8880 = vpack.c.bf16 %v8032, %v8024
  %v8881 = vpack.c.bf16 %v8041, %v8033
  %v8882 = vpack.c.bf16 %v8042, %v8034
  %v8883 = vpack.c.bf16 %v8043, %v8035
  %v8884 = vpack.c.bf16 %v8044, %v8036
  %v8885 = vpack.c.bf16 %v8045, %v8037
  %v8886 = vpack.c.bf16 %v8046, %v8038
  %v8887 = vpack.c.bf16 %v8047, %v8039
  %v8888 = vpack.c.bf16 %v8048, %v8040
  %v8889 = vpack.c.bf16 %v8057, %v8049
  %v8890 = vpack.c.bf16 %v8058, %v8050
  %v8891 = vpack.c.bf16 %v8059, %v8051
  %v8892 = vpack.c.bf16 %v8060, %v8052
  %v8893 = vpack.c.bf16 %v8061, %v8053
  %v8894 = vpack.c.bf16 %v8062, %v8054
  %v8895 = vpack.c.bf16 %v8063, %v8055
  %v8896 = vpack.c.bf16 %v8064, %v8056
  %v8897 = vpack.c.bf16 %v8073, %v8065
  %v8898 = vpack.c.bf16 %v8074, %v8066
  %v8899 = vpack.c.bf16 %v8075, %v8067
  %v8900 = vpack.c.bf16 %v8076, %v8068
  %v8901 = vpack.c.bf16 %v8077, %v8069
  %v8902 = vpack.c.bf16 %v8078, %v8070
  %v8903 = vpack.c.bf16 %v8079, %v8071
  %v8904 = vpack.c.bf16 %v8080, %v8072
  %v8905 = vpack.c.bf16 %v8089, %v8081
  %v8906 = vpack.c.bf16 %v8090, %v8082
  %v8907 = vpack.c.bf16 %v8091, %v8083
  %v8908 = vpack.c.bf16 %v8092, %v8084
  %v8909 = vpack.c.bf16 %v8093, %v8085
  %v8910 = vpack.c.bf16 %v8094, %v8086
  %v8911 = vpack.c.bf16 %v8095, %v8087
  %v8912 = vpack.c.bf16 %v8096, %v8088
  %v8913 = vpack.c.bf16 %v8105, %v8097
  %v8914 = vpack.c.bf16 %v8106, %v8098
  %v8915 = vpack.c.bf16 %v8107, %v8099
  %v8916 = vpack.c.bf16 %v8108, %v8100
  %v8917 = vpack.c.bf16 %v8109, %v8101
  %v8918 = vpack.c.bf16 %v8110, %v8102
  %v8919 = vpack.c.bf16 %v8111, %v8103
  %v8920 = vpack.c.bf16 %v8112, %v8104
  %v8921 = vpack.c.bf16 %v8121, %v8113
  %v8922 = vpack.c.bf16 %v8122, %v8114
  %v8923 = vpack.c.bf16 %v8123, %v8115
  %v8924 = vpack.c.bf16 %v8124, %v8116
  %v8925 = vpack.c.bf16 %v8125, %v8117
  %v8926 = vpack.c.bf16 %v8126, %v8118
  %v8927 = vpack.c.bf16 %v8127, %v8119
  %v8928 = vpack.c.bf16 %v8128, %v8120
  %8929 = vmatprep.subr.bf16.mxu0 %v8403
  %8930 = vmatpush1.bf16.msra.mxu0 %v8402
  %8931 = vmatprep.subr.bf16.mxu0 %v8396
  %8932 = vmatpush1.bf16.msra.mxu0 %v8395
  %8933 = vmatprep.subr.bf16.mxu0 %v8389
  %8934 = vmatpush1.bf16.msra.mxu0 %v8388
  %8935 = vmatprep.subr.bf16.mxu0 %v8382
  %8936 = vmatpush1.bf16.msra.mxu0 %v8381
  %8937 = vmatprep.subr.bf16.mxu0 %v8375
  %8938 = vmatpush1.bf16.msra.mxu0 %v8374
  %8939 = vmatprep.subr.bf16.mxu0 %v8368
  %8940 = vmatpush1.bf16.msra.mxu0 %v8367
  %8941 = vmatprep.subr.bf16.mxu0 %v8361
  %8942 = vmatpush1.bf16.msra.mxu0 %v8360
  %8943 = vmatprep.subr.bf16.mxu0 %v8354
  %8944 = vmatpush1.bf16.msra.mxu0 %v8353
  %8945 = vmatprep.subr.bf16.mxu0 %v8459
  %8946 = vmatpush2.bf16.msra.mxu0 %v8458
  %8947 = vmatprep.subr.bf16.mxu0 %v8452
  %8948 = vmatpush2.bf16.msra.mxu0 %v8451
  %8949 = vmatprep.subr.bf16.mxu0 %v8445
  %8950 = vmatpush2.bf16.msra.mxu0 %v8444
  %8951 = vmatprep.subr.bf16.mxu0 %v8438
  %8952 = vmatpush2.bf16.msra.mxu0 %v8437
  %8953 = vmatprep.subr.bf16.mxu0 %v8431
  %8954 = vmatpush2.bf16.msra.mxu0 %v8430
  %8955 = vmatprep.subr.bf16.mxu0 %v8424
  %8956 = vmatpush2.bf16.msra.mxu0 %v8423
  %8957 = vmatprep.subr.bf16.mxu0 %v8417
  %8958 = vmatpush2.bf16.msra.mxu0 %v8416
  %8959 = vmatprep.subr.bf16.mxu0 %v8410
  %8960 = vmatpush2.bf16.msra.mxu0 %v8409
  %8961 = vmatprep.mubr.bf16.mxu0 %v8802
  %8962 = vmatmul.mubr.bf16.gmra.mxu0 %v8801
  %v8963 = vpop.f32.mrf.mxu0
  %v8964 = vadd.f32 0.0, %v8963
  %v8965 = vpop.f32.mrf.mxu0
  %v8966 = vadd.f32 0.0, %v8965
  %v8967 = vpop.f32.mrf.mxu0
  %v8968 = vadd.f32 0.0, %v8967
  %v8969 = vpop.f32.mrf.mxu0
  %v8970 = vadd.f32 0.0, %v8969
  %8971 = vmatprep.mubr.bf16.mxu0 %v8810
  %8972 = vmatmul.mubr.bf16.gmra.mxu0 %v8809
  %v8973 = vpop.f32.mrf.mxu0
  %v8974 = vadd.f32 0.0, %v8973
  %v8975 = vpop.f32.mrf.mxu0
  %v8976 = vadd.f32 0.0, %v8975
  %v8977 = vpop.f32.mrf.mxu0
  %v8978 = vadd.f32 0.0, %v8977
  %v8979 = vpop.f32.mrf.mxu0
  %v8980 = vadd.f32 0.0, %v8979
  %8981 = vmatprep.mubr.bf16.mxu0 %v8818
  %8982 = vmatmul.mubr.bf16.gmra.mxu0 %v8817
  %v8983 = vpop.f32.mrf.mxu0
  %v8984 = vadd.f32 0.0, %v8983
  %v8985 = vpop.f32.mrf.mxu0
  %v8986 = vadd.f32 0.0, %v8985
  %v8987 = vpop.f32.mrf.mxu0
  %v8988 = vadd.f32 0.0, %v8987
  %v8989 = vpop.f32.mrf.mxu0
  %v8990 = vadd.f32 0.0, %v8989
  %8991 = vmatprep.mubr.bf16.mxu0 %v8826
  %8992 = vmatmul.mubr.bf16.gmra.mxu0 %v8825
  %v8993 = vpop.f32.mrf.mxu0
  %v8994 = vadd.f32 0.0, %v8993
  %v8995 = vpop.f32.mrf.mxu0
  %v8996 = vadd.f32 0.0, %v8995
  %v8997 = vpop.f32.mrf.mxu0
  %v8998 = vadd.f32 0.0, %v8997
  %v8999 = vpop.f32.mrf.mxu0
  %v9000 = vadd.f32 0.0, %v8999
  %9001 = vmatprep.mubr.bf16.mxu0 %v8834
  %9002 = vmatmul.mubr.bf16.gmra.mxu0 %v8833
  %v9003 = vpop.f32.mrf.mxu0
  %v9004 = vadd.f32 0.0, %v9003
  %v9005 = vpop.f32.mrf.mxu0
  %v9006 = vadd.f32 0.0, %v9005
  %v9007 = vpop.f32.mrf.mxu0
  %v9008 = vadd.f32 0.0, %v9007
  %v9009 = vpop.f32.mrf.mxu0
  %v9010 = vadd.f32 0.0, %v9009
  %9011 = vmatprep.mubr.bf16.mxu0 %v8842
  %9012 = vmatmul.mubr.bf16.gmra.mxu0 %v8841
  %v9013 = vpop.f32.mrf.mxu0
  %v9014 = vadd.f32 0.0, %v9013
  %v9015 = vpop.f32.mrf.mxu0
  %v9016 = vadd.f32 0.0, %v9015
  %v9017 = vpop.f32.mrf.mxu0
  %v9018 = vadd.f32 0.0, %v9017
  %v9019 = vpop.f32.mrf.mxu0
  %v9020 = vadd.f32 0.0, %v9019
  %9021 = vmatprep.mubr.bf16.mxu0 %v8850
  %9022 = vmatmul.mubr.bf16.gmra.mxu0 %v8849
  %v9023 = vpop.f32.mrf.mxu0
  %v9024 = vadd.f32 0.0, %v9023
  %v9025 = vpop.f32.mrf.mxu0
  %v9026 = vadd.f32 0.0, %v9025
  %v9027 = vpop.f32.mrf.mxu0
  %v9028 = vadd.f32 0.0, %v9027
  %v9029 = vpop.f32.mrf.mxu0
  %v9030 = vadd.f32 0.0, %v9029
  %9031 = vmatprep.mubr.bf16.mxu0 %v8858
  %9032 = vmatmul.mubr.bf16.gmra.mxu0 %v8857
  %v9033 = vpop.f32.mrf.mxu0
  %v9034 = vadd.f32 0.0, %v9033
  %v9035 = vpop.f32.mrf.mxu0
  %v9036 = vadd.f32 0.0, %v9035
  %v9037 = vpop.f32.mrf.mxu0
  %v9038 = vadd.f32 0.0, %v9037
  %v9039 = vpop.f32.mrf.mxu0
  %v9040 = vadd.f32 0.0, %v9039
  %9041 = vmatprep.mubr.bf16.mxu0 %v8866
  %9042 = vmatmul.mubr.bf16.gmra.mxu0 %v8865
  %v9043 = vpop.f32.mrf.mxu0
  %v9044 = vadd.f32 0.0, %v9043
  %v9045 = vpop.f32.mrf.mxu0
  %v9046 = vadd.f32 0.0, %v9045
  %v9047 = vpop.f32.mrf.mxu0
  %v9048 = vadd.f32 0.0, %v9047
  %v9049 = vpop.f32.mrf.mxu0
  %v9050 = vadd.f32 0.0, %v9049
  %9051 = vmatprep.mubr.bf16.mxu0 %v8874
  %9052 = vmatmul.mubr.bf16.gmra.mxu0 %v8873
  %v9053 = vpop.f32.mrf.mxu0
  %v9054 = vadd.f32 0.0, %v9053
  %v9055 = vpop.f32.mrf.mxu0
  %v9056 = vadd.f32 0.0, %v9055
  %v9057 = vpop.f32.mrf.mxu0
  %v9058 = vadd.f32 0.0, %v9057
  %v9059 = vpop.f32.mrf.mxu0
  %v9060 = vadd.f32 0.0, %v9059
  %9061 = vmatprep.mubr.bf16.mxu0 %v8882
  %9062 = vmatmul.mubr.bf16.gmra.mxu0 %v8881
  %v9063 = vpop.f32.mrf.mxu0
  %v9064 = vadd.f32 0.0, %v9063
  %v9065 = vpop.f32.mrf.mxu0
  %v9066 = vadd.f32 0.0, %v9065
  %v9067 = vpop.f32.mrf.mxu0
  %v9068 = vadd.f32 0.0, %v9067
  %v9069 = vpop.f32.mrf.mxu0
  %v9070 = vadd.f32 0.0, %v9069
  %9071 = vmatprep.mubr.bf16.mxu0 %v8890
  %9072 = vmatmul.mubr.bf16.gmra.mxu0 %v8889
  %v9073 = vpop.f32.mrf.mxu0
  %v9074 = vadd.f32 0.0, %v9073
  %v9075 = vpop.f32.mrf.mxu0
  %v9076 = vadd.f32 0.0, %v9075
  %v9077 = vpop.f32.mrf.mxu0
  %v9078 = vadd.f32 0.0, %v9077
  %v9079 = vpop.f32.mrf.mxu0
  %v9080 = vadd.f32 0.0, %v9079
  %9081 = vmatprep.mubr.bf16.mxu0 %v8898
  %9082 = vmatmul.mubr.bf16.gmra.mxu0 %v8897
  %v9083 = vpop.f32.mrf.mxu0
  %v9084 = vadd.f32 0.0, %v9083
  %v9085 = vpop.f32.mrf.mxu0
  %v9086 = vadd.f32 0.0, %v9085
  %v9087 = vpop.f32.mrf.mxu0
  %v9088 = vadd.f32 0.0, %v9087
  %v9089 = vpop.f32.mrf.mxu0
  %v9090 = vadd.f32 0.0, %v9089
  %9091 = vmatprep.mubr.bf16.mxu0 %v8906
  %9092 = vmatmul.mubr.bf16.gmra.mxu0 %v8905
  %v9093 = vpop.f32.mrf.mxu0
  %v9094 = vadd.f32 0.0, %v9093
  %v9095 = vpop.f32.mrf.mxu0
  %v9096 = vadd.f32 0.0, %v9095
  %v9097 = vpop.f32.mrf.mxu0
  %v9098 = vadd.f32 0.0, %v9097
  %v9099 = vpop.f32.mrf.mxu0
  %v9100 = vadd.f32 0.0, %v9099
  %9101 = vmatprep.mubr.bf16.mxu0 %v8914
  %9102 = vmatmul.mubr.bf16.gmra.mxu0 %v8913
  %v9103 = vpop.f32.mrf.mxu0
  %v9104 = vadd.f32 0.0, %v9103
  %v9105 = vpop.f32.mrf.mxu0
  %v9106 = vadd.f32 0.0, %v9105
  %v9107 = vpop.f32.mrf.mxu0
  %v9108 = vadd.f32 0.0, %v9107
  %v9109 = vpop.f32.mrf.mxu0
  %v9110 = vadd.f32 0.0, %v9109
  %9111 = vmatprep.mubr.bf16.mxu0 %v8922
  %9112 = vmatmul.mubr.bf16.gmra.mxu0 %v8921
  %v9113 = vpop.f32.mrf.mxu0
  %v9114 = vadd.f32 0.0, %v9113
  %v9115 = vpop.f32.mrf.mxu0
  %v9116 = vadd.f32 0.0, %v9115
  %v9117 = vpop.f32.mrf.mxu0
  %v9118 = vadd.f32 0.0, %v9117
  %v9119 = vpop.f32.mrf.mxu0
  %v9120 = vadd.f32 0.0, %v9119
  %9121 = vdwg.mxu0
  %9122 = vmatprep.subr.bf16.mxu0 %v8515
  %9123 = vmatpush1.bf16.msra.mxu0 %v8514
  %9124 = vmatprep.subr.bf16.mxu0 %v8508
  %9125 = vmatpush1.bf16.msra.mxu0 %v8507
  %9126 = vmatprep.subr.bf16.mxu0 %v8501
  %9127 = vmatpush1.bf16.msra.mxu0 %v8500
  %9128 = vmatprep.subr.bf16.mxu0 %v8494
  %9129 = vmatpush1.bf16.msra.mxu0 %v8493
  %9130 = vmatprep.subr.bf16.mxu0 %v8487
  %9131 = vmatpush1.bf16.msra.mxu0 %v8486
  %9132 = vmatprep.subr.bf16.mxu0 %v8480
  %9133 = vmatpush1.bf16.msra.mxu0 %v8479
  %9134 = vmatprep.subr.bf16.mxu0 %v8473
  %9135 = vmatpush1.bf16.msra.mxu0 %v8472
  %9136 = vmatprep.subr.bf16.mxu0 %v8466
  %9137 = vmatpush1.bf16.msra.mxu0 %v8465
  %9138 = vmatprep.subr.bf16.mxu0 %v8571
  %9139 = vmatpush2.bf16.msra.mxu0 %v8570
  %9140 = vmatprep.subr.bf16.mxu0 %v8564
  %9141 = vmatpush2.bf16.msra.mxu0 %v8563
  %9142 = vmatprep.subr.bf16.mxu0 %v8557
  %9143 = vmatpush2.bf16.msra.mxu0 %v8556
  %9144 = vmatprep.subr.bf16.mxu0 %v8550
  %9145 = vmatpush2.bf16.msra.mxu0 %v8549
  %9146 = vmatprep.subr.bf16.mxu0 %v8543
  %9147 = vmatpush2.bf16.msra.mxu0 %v8542
  %9148 = vmatprep.subr.bf16.mxu0 %v8536
  %9149 = vmatpush2.bf16.msra.mxu0 %v8535
  %9150 = vmatprep.subr.bf16.mxu0 %v8529
  %9151 = vmatpush2.bf16.msra.mxu0 %v8528
  %9152 = vmatprep.subr.bf16.mxu0 %v8522
  %9153 = vmatpush2.bf16.msra.mxu0 %v8521
  %9154 = vmatprep.mubr.bf16.mxu0 %v8804
  %9155 = vmatmul.mubr.bf16.gmra.mxu0 %v8803
  %v9156 = vpop.f32.mrf.mxu0
  %v9157 = vadd.f32 %v8964, %v9156
  %v9158 = vpop.f32.mrf.mxu0
  %v9159 = vadd.f32 %v8966, %v9158
  %v9160 = vpop.f32.mrf.mxu0
  %v9161 = vadd.f32 %v8968, %v9160
  %v9162 = vpop.f32.mrf.mxu0
  %v9163 = vadd.f32 %v8970, %v9162
  %9164 = vmatprep.mubr.bf16.mxu0 %v8812
  %9165 = vmatmul.mubr.bf16.gmra.mxu0 %v8811
  %v9166 = vpop.f32.mrf.mxu0
  %v9167 = vadd.f32 %v8974, %v9166
  %v9168 = vpop.f32.mrf.mxu0
  %v9169 = vadd.f32 %v8976, %v9168
  %v9170 = vpop.f32.mrf.mxu0
  %v9171 = vadd.f32 %v8978, %v9170
  %v9172 = vpop.f32.mrf.mxu0
  %v9173 = vadd.f32 %v8980, %v9172
  %9174 = vmatprep.mubr.bf16.mxu0 %v8820
  %9175 = vmatmul.mubr.bf16.gmra.mxu0 %v8819
  %v9176 = vpop.f32.mrf.mxu0
  %v9177 = vadd.f32 %v8984, %v9176
  %v9178 = vpop.f32.mrf.mxu0
  %v9179 = vadd.f32 %v8986, %v9178
  %v9180 = vpop.f32.mrf.mxu0
  %v9181 = vadd.f32 %v8988, %v9180
  %v9182 = vpop.f32.mrf.mxu0
  %v9183 = vadd.f32 %v8990, %v9182
  %9184 = vmatprep.mubr.bf16.mxu0 %v8828
  %9185 = vmatmul.mubr.bf16.gmra.mxu0 %v8827
  %v9186 = vpop.f32.mrf.mxu0
  %v9187 = vadd.f32 %v8994, %v9186
  %v9188 = vpop.f32.mrf.mxu0
  %v9189 = vadd.f32 %v8996, %v9188
  %v9190 = vpop.f32.mrf.mxu0
  %v9191 = vadd.f32 %v8998, %v9190
  %v9192 = vpop.f32.mrf.mxu0
  %v9193 = vadd.f32 %v9000, %v9192
  %9194 = vmatprep.mubr.bf16.mxu0 %v8836
  %9195 = vmatmul.mubr.bf16.gmra.mxu0 %v8835
  %v9196 = vpop.f32.mrf.mxu0
  %v9197 = vadd.f32 %v9004, %v9196
  %v9198 = vpop.f32.mrf.mxu0
  %v9199 = vadd.f32 %v9006, %v9198
  %v9200 = vpop.f32.mrf.mxu0
  %v9201 = vadd.f32 %v9008, %v9200
  %v9202 = vpop.f32.mrf.mxu0
  %v9203 = vadd.f32 %v9010, %v9202
  %9204 = vmatprep.mubr.bf16.mxu0 %v8844
  %9205 = vmatmul.mubr.bf16.gmra.mxu0 %v8843
  %v9206 = vpop.f32.mrf.mxu0
  %v9207 = vadd.f32 %v9014, %v9206
  %v9208 = vpop.f32.mrf.mxu0
  %v9209 = vadd.f32 %v9016, %v9208
  %v9210 = vpop.f32.mrf.mxu0
  %v9211 = vadd.f32 %v9018, %v9210
  %v9212 = vpop.f32.mrf.mxu0
  %v9213 = vadd.f32 %v9020, %v9212
  %9214 = vmatprep.mubr.bf16.mxu0 %v8852
  %9215 = vmatmul.mubr.bf16.gmra.mxu0 %v8851
  %v9216 = vpop.f32.mrf.mxu0
  %v9217 = vadd.f32 %v9024, %v9216
  %v9218 = vpop.f32.mrf.mxu0
  %v9219 = vadd.f32 %v9026, %v9218
  %v9220 = vpop.f32.mrf.mxu0
  %v9221 = vadd.f32 %v9028, %v9220
  %v9222 = vpop.f32.mrf.mxu0
  %v9223 = vadd.f32 %v9030, %v9222
  %9224 = vmatprep.mubr.bf16.mxu0 %v8860
  %9225 = vmatmul.mubr.bf16.gmra.mxu0 %v8859
  %v9226 = vpop.f32.mrf.mxu0
  %v9227 = vadd.f32 %v9034, %v9226
  %v9228 = vpop.f32.mrf.mxu0
  %v9229 = vadd.f32 %v9036, %v9228
  %v9230 = vpop.f32.mrf.mxu0
  %v9231 = vadd.f32 %v9038, %v9230
  %v9232 = vpop.f32.mrf.mxu0
  %v9233 = vadd.f32 %v9040, %v9232
  %9234 = vmatprep.mubr.bf16.mxu0 %v8868
  %9235 = vmatmul.mubr.bf16.gmra.mxu0 %v8867
  %v9236 = vpop.f32.mrf.mxu0
  %v9237 = vadd.f32 %v9044, %v9236
  %v9238 = vpop.f32.mrf.mxu0
  %v9239 = vadd.f32 %v9046, %v9238
  %v9240 = vpop.f32.mrf.mxu0
  %v9241 = vadd.f32 %v9048, %v9240
  %v9242 = vpop.f32.mrf.mxu0
  %v9243 = vadd.f32 %v9050, %v9242
  %9244 = vmatprep.mubr.bf16.mxu0 %v8876
  %9245 = vmatmul.mubr.bf16.gmra.mxu0 %v8875
  %v9246 = vpop.f32.mrf.mxu0
  %v9247 = vadd.f32 %v9054, %v9246
  %v9248 = vpop.f32.mrf.mxu0
  %v9249 = vadd.f32 %v9056, %v9248
  %v9250 = vpop.f32.mrf.mxu0
  %v9251 = vadd.f32 %v9058, %v9250
  %v9252 = vpop.f32.mrf.mxu0
  %v9253 = vadd.f32 %v9060, %v9252
  %9254 = vmatprep.mubr.bf16.mxu0 %v8884
  %9255 = vmatmul.mubr.bf16.gmra.mxu0 %v8883
  %v9256 = vpop.f32.mrf.mxu0
  %v9257 = vadd.f32 %v9064, %v9256
  %v9258 = vpop.f32.mrf.mxu0
  %v9259 = vadd.f32 %v9066, %v9258
  %v9260 = vpop.f32.mrf.mxu0
  %v9261 = vadd.f32 %v9068, %v9260
  %v9262 = vpop.f32.mrf.mxu0
  %v9263 = vadd.f32 %v9070, %v9262
  %9264 = vmatprep.mubr.bf16.mxu0 %v8892
  %9265 = vmatmul.mubr.bf16.gmra.mxu0 %v8891
  %v9266 = vpop.f32.mrf.mxu0
  %v9267 = vadd.f32 %v9074, %v9266
  %v9268 = vpop.f32.mrf.mxu0
  %v9269 = vadd.f32 %v9076, %v9268
  %v9270 = vpop.f32.mrf.mxu0
  %v9271 = vadd.f32 %v9078, %v9270
  %v9272 = vpop.f32.mrf.mxu0
  %v9273 = vadd.f32 %v9080, %v9272
  %9274 = vmatprep.mubr.bf16.mxu0 %v8900
  %9275 = vmatmul.mubr.bf16.gmra.mxu0 %v8899
  %v9276 = vpop.f32.mrf.mxu0
  %v9277 = vadd.f32 %v9084, %v9276
  %v9278 = vpop.f32.mrf.mxu0
  %v9279 = vadd.f32 %v9086, %v9278
  %v9280 = vpop.f32.mrf.mxu0
  %v9281 = vadd.f32 %v9088, %v9280
  %v9282 = vpop.f32.mrf.mxu0
  %v9283 = vadd.f32 %v9090, %v9282
  %9284 = vmatprep.mubr.bf16.mxu0 %v8908
  %9285 = vmatmul.mubr.bf16.gmra.mxu0 %v8907
  %v9286 = vpop.f32.mrf.mxu0
  %v9287 = vadd.f32 %v9094, %v9286
  %v9288 = vpop.f32.mrf.mxu0
  %v9289 = vadd.f32 %v9096, %v9288
  %v9290 = vpop.f32.mrf.mxu0
  %v9291 = vadd.f32 %v9098, %v9290
  %v9292 = vpop.f32.mrf.mxu0
  %v9293 = vadd.f32 %v9100, %v9292
  %9294 = vmatprep.mubr.bf16.mxu0 %v8916
  %9295 = vmatmul.mubr.bf16.gmra.mxu0 %v8915
  %v9296 = vpop.f32.mrf.mxu0
  %v9297 = vadd.f32 %v9104, %v9296
  %v9298 = vpop.f32.mrf.mxu0
  %v9299 = vadd.f32 %v9106, %v9298
  %v9300 = vpop.f32.mrf.mxu0
  %v9301 = vadd.f32 %v9108, %v9300
  %v9302 = vpop.f32.mrf.mxu0
  %v9303 = vadd.f32 %v9110, %v9302
  %9304 = vmatprep.mubr.bf16.mxu0 %v8924
  %9305 = vmatmul.mubr.bf16.gmra.mxu0 %v8923
  %v9306 = vpop.f32.mrf.mxu0
  %v9307 = vadd.f32 %v9114, %v9306
  %v9308 = vpop.f32.mrf.mxu0
  %v9309 = vadd.f32 %v9116, %v9308
  %v9310 = vpop.f32.mrf.mxu0
  %v9311 = vadd.f32 %v9118, %v9310
  %v9312 = vpop.f32.mrf.mxu0
  %v9313 = vadd.f32 %v9120, %v9312
  %9314 = vdwg.mxu0
  %9315 = vmatprep.subr.bf16.mxu0 %v8627
  %9316 = vmatpush1.bf16.msra.mxu0 %v8626
  %9317 = vmatprep.subr.bf16.mxu0 %v8620
  %9318 = vmatpush1.bf16.msra.mxu0 %v8619
  %9319 = vmatprep.subr.bf16.mxu0 %v8613
  %9320 = vmatpush1.bf16.msra.mxu0 %v8612
  %9321 = vmatprep.subr.bf16.mxu0 %v8606
  %9322 = vmatpush1.bf16.msra.mxu0 %v8605
  %9323 = vmatprep.subr.bf16.mxu0 %v8599
  %9324 = vmatpush1.bf16.msra.mxu0 %v8598
  %9325 = vmatprep.subr.bf16.mxu0 %v8592
  %9326 = vmatpush1.bf16.msra.mxu0 %v8591
  %9327 = vmatprep.subr.bf16.mxu0 %v8585
  %9328 = vmatpush1.bf16.msra.mxu0 %v8584
  %9329 = vmatprep.subr.bf16.mxu0 %v8578
  %9330 = vmatpush1.bf16.msra.mxu0 %v8577
  %9331 = vmatprep.subr.bf16.mxu0 %v8683
  %9332 = vmatpush2.bf16.msra.mxu0 %v8682
  %9333 = vmatprep.subr.bf16.mxu0 %v8676
  %9334 = vmatpush2.bf16.msra.mxu0 %v8675
  %9335 = vmatprep.subr.bf16.mxu0 %v8669
  %9336 = vmatpush2.bf16.msra.mxu0 %v8668
  %9337 = vmatprep.subr.bf16.mxu0 %v8662
  %9338 = vmatpush2.bf16.msra.mxu0 %v8661
  %9339 = vmatprep.subr.bf16.mxu0 %v8655
  %9340 = vmatpush2.bf16.msra.mxu0 %v8654
  %9341 = vmatprep.subr.bf16.mxu0 %v8648
  %9342 = vmatpush2.bf16.msra.mxu0 %v8647
  %9343 = vmatprep.subr.bf16.mxu0 %v8641
  %9344 = vmatpush2.bf16.msra.mxu0 %v8640
  %9345 = vmatprep.subr.bf16.mxu0 %v8634
  %9346 = vmatpush2.bf16.msra.mxu0 %v8633
  %9347 = vmatprep.mubr.bf16.mxu0 %v8806
  %9348 = vmatmul.mubr.bf16.gmra.mxu0 %v8805
  %v9349 = vpop.f32.mrf.mxu0
  %v9350 = vadd.f32 %v9157, %v9349
  %v9351 = vpop.f32.mrf.mxu0
  %v9352 = vadd.f32 %v9159, %v9351
  %v9353 = vpop.f32.mrf.mxu0
  %v9354 = vadd.f32 %v9161, %v9353
  %v9355 = vpop.f32.mrf.mxu0
  %v9356 = vadd.f32 %v9163, %v9355
  %9357 = vmatprep.mubr.bf16.mxu0 %v8814
  %9358 = vmatmul.mubr.bf16.gmra.mxu0 %v8813
  %v9359 = vpop.f32.mrf.mxu0
  %v9360 = vadd.f32 %v9167, %v9359
  %v9361 = vpop.f32.mrf.mxu0
  %v9362 = vadd.f32 %v9169, %v9361
  %v9363 = vpop.f32.mrf.mxu0
  %v9364 = vadd.f32 %v9171, %v9363
  %v9365 = vpop.f32.mrf.mxu0
  %v9366 = vadd.f32 %v9173, %v9365
  %9367 = vmatprep.mubr.bf16.mxu0 %v8822
  %9368 = vmatmul.mubr.bf16.gmra.mxu0 %v8821
  %v9369 = vpop.f32.mrf.mxu0
  %v9370 = vadd.f32 %v9177, %v9369
  %v9371 = vpop.f32.mrf.mxu0
  %v9372 = vadd.f32 %v9179, %v9371
  %v9373 = vpop.f32.mrf.mxu0
  %v9374 = vadd.f32 %v9181, %v9373
  %v9375 = vpop.f32.mrf.mxu0
  %v9376 = vadd.f32 %v9183, %v9375
  %9377 = vmatprep.mubr.bf16.mxu0 %v8830
  %9378 = vmatmul.mubr.bf16.gmra.mxu0 %v8829
  %v9379 = vpop.f32.mrf.mxu0
  %v9380 = vadd.f32 %v9187, %v9379
  %v9381 = vpop.f32.mrf.mxu0
  %v9382 = vadd.f32 %v9189, %v9381
  %v9383 = vpop.f32.mrf.mxu0
  %v9384 = vadd.f32 %v9191, %v9383
  %v9385 = vpop.f32.mrf.mxu0
  %v9386 = vadd.f32 %v9193, %v9385
  %9387 = vmatprep.mubr.bf16.mxu0 %v8838
  %9388 = vmatmul.mubr.bf16.gmra.mxu0 %v8837
  %v9389 = vpop.f32.mrf.mxu0
  %v9390 = vadd.f32 %v9197, %v9389
  %v9391 = vpop.f32.mrf.mxu0
  %v9392 = vadd.f32 %v9199, %v9391
  %v9393 = vpop.f32.mrf.mxu0
  %v9394 = vadd.f32 %v9201, %v9393
  %v9395 = vpop.f32.mrf.mxu0
  %v9396 = vadd.f32 %v9203, %v9395
  %9397 = vmatprep.mubr.bf16.mxu0 %v8846
  %9398 = vmatmul.mubr.bf16.gmra.mxu0 %v8845
  %v9399 = vpop.f32.mrf.mxu0
  %v9400 = vadd.f32 %v9207, %v9399
  %v9401 = vpop.f32.mrf.mxu0
  %v9402 = vadd.f32 %v9209, %v9401
  %v9403 = vpop.f32.mrf.mxu0
  %v9404 = vadd.f32 %v9211, %v9403
  %v9405 = vpop.f32.mrf.mxu0
  %v9406 = vadd.f32 %v9213, %v9405
  %9407 = vmatprep.mubr.bf16.mxu0 %v8854
  %9408 = vmatmul.mubr.bf16.gmra.mxu0 %v8853
  %v9409 = vpop.f32.mrf.mxu0
  %v9410 = vadd.f32 %v9217, %v9409
  %v9411 = vpop.f32.mrf.mxu0
  %v9412 = vadd.f32 %v9219, %v9411
  %v9413 = vpop.f32.mrf.mxu0
  %v9414 = vadd.f32 %v9221, %v9413
  %v9415 = vpop.f32.mrf.mxu0
  %v9416 = vadd.f32 %v9223, %v9415
  %9417 = vmatprep.mubr.bf16.mxu0 %v8862
  %9418 = vmatmul.mubr.bf16.gmra.mxu0 %v8861
  %v9419 = vpop.f32.mrf.mxu0
  %v9420 = vadd.f32 %v9227, %v9419
  %v9421 = vpop.f32.mrf.mxu0
  %v9422 = vadd.f32 %v9229, %v9421
  %v9423 = vpop.f32.mrf.mxu0
  %v9424 = vadd.f32 %v9231, %v9423
  %v9425 = vpop.f32.mrf.mxu0
  %v9426 = vadd.f32 %v9233, %v9425
  %9427 = vmatprep.mubr.bf16.mxu0 %v8870
  %9428 = vmatmul.mubr.bf16.gmra.mxu0 %v8869
  %v9429 = vpop.f32.mrf.mxu0
  %v9430 = vadd.f32 %v9237, %v9429
  %v9431 = vpop.f32.mrf.mxu0
  %v9432 = vadd.f32 %v9239, %v9431
  %v9433 = vpop.f32.mrf.mxu0
  %v9434 = vadd.f32 %v9241, %v9433
  %v9435 = vpop.f32.mrf.mxu0
  %v9436 = vadd.f32 %v9243, %v9435
  %9437 = vmatprep.mubr.bf16.mxu0 %v8878
  %9438 = vmatmul.mubr.bf16.gmra.mxu0 %v8877
  %v9439 = vpop.f32.mrf.mxu0
  %v9440 = vadd.f32 %v9247, %v9439
  %v9441 = vpop.f32.mrf.mxu0
  %v9442 = vadd.f32 %v9249, %v9441
  %v9443 = vpop.f32.mrf.mxu0
  %v9444 = vadd.f32 %v9251, %v9443
  %v9445 = vpop.f32.mrf.mxu0
  %v9446 = vadd.f32 %v9253, %v9445
  %9447 = vmatprep.mubr.bf16.mxu0 %v8886
  %9448 = vmatmul.mubr.bf16.gmra.mxu0 %v8885
  %v9449 = vpop.f32.mrf.mxu0
  %v9450 = vadd.f32 %v9257, %v9449
  %v9451 = vpop.f32.mrf.mxu0
  %v9452 = vadd.f32 %v9259, %v9451
  %v9453 = vpop.f32.mrf.mxu0
  %v9454 = vadd.f32 %v9261, %v9453
  %v9455 = vpop.f32.mrf.mxu0
  %v9456 = vadd.f32 %v9263, %v9455
  %9457 = vmatprep.mubr.bf16.mxu0 %v8894
  %9458 = vmatmul.mubr.bf16.gmra.mxu0 %v8893
  %v9459 = vpop.f32.mrf.mxu0
  %v9460 = vadd.f32 %v9267, %v9459
  %v9461 = vpop.f32.mrf.mxu0
  %v9462 = vadd.f32 %v9269, %v9461
  %v9463 = vpop.f32.mrf.mxu0
  %v9464 = vadd.f32 %v9271, %v9463
  %v9465 = vpop.f32.mrf.mxu0
  %v9466 = vadd.f32 %v9273, %v9465
  %9467 = vmatprep.mubr.bf16.mxu0 %v8902
  %9468 = vmatmul.mubr.bf16.gmra.mxu0 %v8901
  %v9469 = vpop.f32.mrf.mxu0
  %v9470 = vadd.f32 %v9277, %v9469
  %v9471 = vpop.f32.mrf.mxu0
  %v9472 = vadd.f32 %v9279, %v9471
  %v9473 = vpop.f32.mrf.mxu0
  %v9474 = vadd.f32 %v9281, %v9473
  %v9475 = vpop.f32.mrf.mxu0
  %v9476 = vadd.f32 %v9283, %v9475
  %9477 = vmatprep.mubr.bf16.mxu0 %v8910
  %9478 = vmatmul.mubr.bf16.gmra.mxu0 %v8909
  %v9479 = vpop.f32.mrf.mxu0
  %v9480 = vadd.f32 %v9287, %v9479
  %v9481 = vpop.f32.mrf.mxu0
  %v9482 = vadd.f32 %v9289, %v9481
  %v9483 = vpop.f32.mrf.mxu0
  %v9484 = vadd.f32 %v9291, %v9483
  %v9485 = vpop.f32.mrf.mxu0
  %v9486 = vadd.f32 %v9293, %v9485
  %9487 = vmatprep.mubr.bf16.mxu0 %v8918
  %9488 = vmatmul.mubr.bf16.gmra.mxu0 %v8917
  %v9489 = vpop.f32.mrf.mxu0
  %v9490 = vadd.f32 %v9297, %v9489
  %v9491 = vpop.f32.mrf.mxu0
  %v9492 = vadd.f32 %v9299, %v9491
  %v9493 = vpop.f32.mrf.mxu0
  %v9494 = vadd.f32 %v9301, %v9493
  %v9495 = vpop.f32.mrf.mxu0
  %v9496 = vadd.f32 %v9303, %v9495
  %9497 = vmatprep.mubr.bf16.mxu0 %v8926
  %9498 = vmatmul.mubr.bf16.gmra.mxu0 %v8925
  %v9499 = vpop.f32.mrf.mxu0
  %v9500 = vadd.f32 %v9307, %v9499
  %v9501 = vpop.f32.mrf.mxu0
  %v9502 = vadd.f32 %v9309, %v9501
  %v9503 = vpop.f32.mrf.mxu0
  %v9504 = vadd.f32 %v9311, %v9503
  %v9505 = vpop.f32.mrf.mxu0
  %v9506 = vadd.f32 %v9313, %v9505
  %9507 = vdwg.mxu0
  %9508 = vmatprep.subr.bf16.mxu0 %v8739
  %9509 = vmatpush1.bf16.msra.mxu0 %v8738
  %9510 = vmatprep.subr.bf16.mxu0 %v8732
  %9511 = vmatpush1.bf16.msra.mxu0 %v8731
  %9512 = vmatprep.subr.bf16.mxu0 %v8725
  %9513 = vmatpush1.bf16.msra.mxu0 %v8724
  %9514 = vmatprep.subr.bf16.mxu0 %v8718
  %9515 = vmatpush1.bf16.msra.mxu0 %v8717
  %9516 = vmatprep.subr.bf16.mxu0 %v8711
  %9517 = vmatpush1.bf16.msra.mxu0 %v8710
  %9518 = vmatprep.subr.bf16.mxu0 %v8704
  %9519 = vmatpush1.bf16.msra.mxu0 %v8703
  %9520 = vmatprep.subr.bf16.mxu0 %v8697
  %9521 = vmatpush1.bf16.msra.mxu0 %v8696
  %9522 = vmatprep.subr.bf16.mxu0 %v8690
  %9523 = vmatpush1.bf16.msra.mxu0 %v8689
  %9524 = vmatprep.subr.bf16.mxu0 %v8795
  %9525 = vmatpush2.bf16.msra.mxu0 %v8794
  %9526 = vmatprep.subr.bf16.mxu0 %v8788
  %9527 = vmatpush2.bf16.msra.mxu0 %v8787
  %9528 = vmatprep.subr.bf16.mxu0 %v8781
  %9529 = vmatpush2.bf16.msra.mxu0 %v8780
  %9530 = vmatprep.subr.bf16.mxu0 %v8774
  %9531 = vmatpush2.bf16.msra.mxu0 %v8773
  %9532 = vmatprep.subr.bf16.mxu0 %v8767
  %9533 = vmatpush2.bf16.msra.mxu0 %v8766
  %9534 = vmatprep.subr.bf16.mxu0 %v8760
  %9535 = vmatpush2.bf16.msra.mxu0 %v8759
  %9536 = vmatprep.subr.bf16.mxu0 %v8753
  %9537 = vmatpush2.bf16.msra.mxu0 %v8752
  %9538 = vmatprep.subr.bf16.mxu0 %v8746
  %9539 = vmatpush2.bf16.msra.mxu0 %v8745
  %9540 = vmatprep.mubr.bf16.mxu0 %v8808
  %9541 = vmatmul.mubr.bf16.gmra.mxu0 %v8807
  %v9542 = vpop.f32.mrf.mxu0
  %v9543 = vadd.f32 %v9350, %v9542
  %v9544 = vpop.f32.mrf.mxu0
  %v9545 = vadd.f32 %v9352, %v9544
  %v9546 = vpop.f32.mrf.mxu0
  %v9547 = vadd.f32 %v9354, %v9546
  %v9548 = vpop.f32.mrf.mxu0
  %v9549 = vadd.f32 %v9356, %v9548
  %9550 = vmatprep.mubr.bf16.mxu0 %v8816
  %9551 = vmatmul.mubr.bf16.gmra.mxu0 %v8815
  %v9552 = vpop.f32.mrf.mxu0
  %v9553 = vadd.f32 %v9360, %v9552
  %v9554 = vpop.f32.mrf.mxu0
  %v9555 = vadd.f32 %v9362, %v9554
  %v9556 = vpop.f32.mrf.mxu0
  %v9557 = vadd.f32 %v9364, %v9556
  %v9558 = vpop.f32.mrf.mxu0
  %v9559 = vadd.f32 %v9366, %v9558
  %9560 = vmatprep.mubr.bf16.mxu0 %v8824
  %9561 = vmatmul.mubr.bf16.gmra.mxu0 %v8823
  %v9562 = vpop.f32.mrf.mxu0
  %v9563 = vadd.f32 %v9370, %v9562
  %v9564 = vpop.f32.mrf.mxu0
  %v9565 = vadd.f32 %v9372, %v9564
  %v9566 = vpop.f32.mrf.mxu0
  %v9567 = vadd.f32 %v9374, %v9566
  %v9568 = vpop.f32.mrf.mxu0
  %v9569 = vadd.f32 %v9376, %v9568
  %9570 = vmatprep.mubr.bf16.mxu0 %v8832
  %9571 = vmatmul.mubr.bf16.gmra.mxu0 %v8831
  %v9572 = vpop.f32.mrf.mxu0
  %v9573 = vadd.f32 %v9380, %v9572
  %v9574 = vpop.f32.mrf.mxu0
  %v9575 = vadd.f32 %v9382, %v9574
  %v9576 = vpop.f32.mrf.mxu0
  %v9577 = vadd.f32 %v9384, %v9576
  %v9578 = vpop.f32.mrf.mxu0
  %v9579 = vadd.f32 %v9386, %v9578
  %9580 = vmatprep.mubr.bf16.mxu0 %v8840
  %9581 = vmatmul.mubr.bf16.gmra.mxu0 %v8839
  %v9582 = vpop.f32.mrf.mxu0
  %v9583 = vadd.f32 %v9390, %v9582
  %v9584 = vpop.f32.mrf.mxu0
  %v9585 = vadd.f32 %v9392, %v9584
  %v9586 = vpop.f32.mrf.mxu0
  %v9587 = vadd.f32 %v9394, %v9586
  %v9588 = vpop.f32.mrf.mxu0
  %v9589 = vadd.f32 %v9396, %v9588
  %9590 = vmatprep.mubr.bf16.mxu0 %v8848
  %9591 = vmatmul.mubr.bf16.gmra.mxu0 %v8847
  %v9592 = vpop.f32.mrf.mxu0
  %v9593 = vadd.f32 %v9400, %v9592
  %v9594 = vpop.f32.mrf.mxu0
  %v9595 = vadd.f32 %v9402, %v9594
  %v9596 = vpop.f32.mrf.mxu0
  %v9597 = vadd.f32 %v9404, %v9596
  %v9598 = vpop.f32.mrf.mxu0
  %v9599 = vadd.f32 %v9406, %v9598
  %9600 = vmatprep.mubr.bf16.mxu0 %v8856
  %9601 = vmatmul.mubr.bf16.gmra.mxu0 %v8855
  %v9602 = vpop.f32.mrf.mxu0
  %v9603 = vadd.f32 %v9410, %v9602
  %v9604 = vpop.f32.mrf.mxu0
  %v9605 = vadd.f32 %v9412, %v9604
  %v9606 = vpop.f32.mrf.mxu0
  %v9607 = vadd.f32 %v9414, %v9606
  %v9608 = vpop.f32.mrf.mxu0
  %v9609 = vadd.f32 %v9416, %v9608
  %9610 = vmatprep.mubr.bf16.mxu0 %v8864
  %9611 = vmatmul.mubr.bf16.gmra.mxu0 %v8863
  %v9612 = vpop.f32.mrf.mxu0
  %v9613 = vadd.f32 %v9420, %v9612
  %v9614 = vpop.f32.mrf.mxu0
  %v9615 = vadd.f32 %v9422, %v9614
  %v9616 = vpop.f32.mrf.mxu0
  %v9617 = vadd.f32 %v9424, %v9616
  %v9618 = vpop.f32.mrf.mxu0
  %v9619 = vadd.f32 %v9426, %v9618
  %9620 = vmatprep.mubr.bf16.mxu0 %v8872
  %9621 = vmatmul.mubr.bf16.gmra.mxu0 %v8871
  %v9622 = vpop.f32.mrf.mxu0
  %v9623 = vadd.f32 %v9430, %v9622
  %v9624 = vpop.f32.mrf.mxu0
  %v9625 = vadd.f32 %v9432, %v9624
  %v9626 = vpop.f32.mrf.mxu0
  %v9627 = vadd.f32 %v9434, %v9626
  %v9628 = vpop.f32.mrf.mxu0
  %v9629 = vadd.f32 %v9436, %v9628
  %9630 = vmatprep.mubr.bf16.mxu0 %v8880
  %9631 = vmatmul.mubr.bf16.gmra.mxu0 %v8879
  %v9632 = vpop.f32.mrf.mxu0
  %v9633 = vadd.f32 %v9440, %v9632
  %v9634 = vpop.f32.mrf.mxu0
  %v9635 = vadd.f32 %v9442, %v9634
  %v9636 = vpop.f32.mrf.mxu0
  %v9637 = vadd.f32 %v9444, %v9636
  %v9638 = vpop.f32.mrf.mxu0
  %v9639 = vadd.f32 %v9446, %v9638
  %9640 = vmatprep.mubr.bf16.mxu0 %v8888
  %9641 = vmatmul.mubr.bf16.gmra.mxu0 %v8887
  %v9642 = vpop.f32.mrf.mxu0
  %v9643 = vadd.f32 %v9450, %v9642
  %v9644 = vpop.f32.mrf.mxu0
  %v9645 = vadd.f32 %v9452, %v9644
  %v9646 = vpop.f32.mrf.mxu0
  %v9647 = vadd.f32 %v9454, %v9646
  %v9648 = vpop.f32.mrf.mxu0
  %v9649 = vadd.f32 %v9456, %v9648
  %9650 = vmatprep.mubr.bf16.mxu0 %v8896
  %9651 = vmatmul.mubr.bf16.gmra.mxu0 %v8895
  %v9652 = vpop.f32.mrf.mxu0
  %v9653 = vadd.f32 %v9460, %v9652
  %v9654 = vpop.f32.mrf.mxu0
  %v9655 = vadd.f32 %v9462, %v9654
  %v9656 = vpop.f32.mrf.mxu0
  %v9657 = vadd.f32 %v9464, %v9656
  %v9658 = vpop.f32.mrf.mxu0
  %v9659 = vadd.f32 %v9466, %v9658
  %9660 = vmatprep.mubr.bf16.mxu0 %v8904
  %9661 = vmatmul.mubr.bf16.gmra.mxu0 %v8903
  %v9662 = vpop.f32.mrf.mxu0
  %v9663 = vadd.f32 %v9470, %v9662
  %v9664 = vpop.f32.mrf.mxu0
  %v9665 = vadd.f32 %v9472, %v9664
  %v9666 = vpop.f32.mrf.mxu0
  %v9667 = vadd.f32 %v9474, %v9666
  %v9668 = vpop.f32.mrf.mxu0
  %v9669 = vadd.f32 %v9476, %v9668
  %9670 = vmatprep.mubr.bf16.mxu0 %v8912
  %9671 = vmatmul.mubr.bf16.gmra.mxu0 %v8911
  %v9672 = vpop.f32.mrf.mxu0
  %v9673 = vadd.f32 %v9480, %v9672
  %v9674 = vpop.f32.mrf.mxu0
  %v9675 = vadd.f32 %v9482, %v9674
  %v9676 = vpop.f32.mrf.mxu0
  %v9677 = vadd.f32 %v9484, %v9676
  %v9678 = vpop.f32.mrf.mxu0
  %v9679 = vadd.f32 %v9486, %v9678
  %9680 = vmatprep.mubr.bf16.mxu0 %v8920
  %9681 = vmatmul.mubr.bf16.gmra.mxu0 %v8919
  %v9682 = vpop.f32.mrf.mxu0
  %v9683 = vadd.f32 %v9490, %v9682
  %v9684 = vpop.f32.mrf.mxu0
  %v9685 = vadd.f32 %v9492, %v9684
  %v9686 = vpop.f32.mrf.mxu0
  %v9687 = vadd.f32 %v9494, %v9686
  %v9688 = vpop.f32.mrf.mxu0
  %v9689 = vadd.f32 %v9496, %v9688
  %9690 = vmatprep.mubr.bf16.mxu0 %v8928
  %9691 = vmatmul.mubr.bf16.gmra.mxu0 %v8927
  %v9692 = vpop.f32.mrf.mxu0
  %v9693 = vadd.f32 %v9500, %v9692
  %v9694 = vpop.f32.mrf.mxu0
  %v9695 = vadd.f32 %v9502, %v9694
  %v9696 = vpop.f32.mrf.mxu0
  %v9697 = vadd.f32 %v9504, %v9696
  %v9698 = vpop.f32.mrf.mxu0
  %v9699 = vadd.f32 %v9506, %v9698
  %9700 = vdwg.mxu0
  %9701 = vmatprep.subr.bf16.mxu0 %v8405
  %9702 = vmatpush1.bf16.msra.mxu0 %v8404
  %9703 = vmatprep.subr.bf16.mxu0 %v8398
  %9704 = vmatpush1.bf16.msra.mxu0 %v8397
  %9705 = vmatprep.subr.bf16.mxu0 %v8391
  %9706 = vmatpush1.bf16.msra.mxu0 %v8390
  %9707 = vmatprep.subr.bf16.mxu0 %v8384
  %9708 = vmatpush1.bf16.msra.mxu0 %v8383
  %9709 = vmatprep.subr.bf16.mxu0 %v8377
  %9710 = vmatpush1.bf16.msra.mxu0 %v8376
  %9711 = vmatprep.subr.bf16.mxu0 %v8370
  %9712 = vmatpush1.bf16.msra.mxu0 %v8369
  %9713 = vmatprep.subr.bf16.mxu0 %v8363
  %9714 = vmatpush1.bf16.msra.mxu0 %v8362
  %9715 = vmatprep.subr.bf16.mxu0 %v8356
  %9716 = vmatpush1.bf16.msra.mxu0 %v8355
  %9717 = vmatprep.subr.bf16.mxu0 %v8461
  %9718 = vmatpush2.bf16.msra.mxu0 %v8460
  %9719 = vmatprep.subr.bf16.mxu0 %v8454
  %9720 = vmatpush2.bf16.msra.mxu0 %v8453
  %9721 = vmatprep.subr.bf16.mxu0 %v8447
  %9722 = vmatpush2.bf16.msra.mxu0 %v8446
  %9723 = vmatprep.subr.bf16.mxu0 %v8440
  %9724 = vmatpush2.bf16.msra.mxu0 %v8439
  %9725 = vmatprep.subr.bf16.mxu0 %v8433
  %9726 = vmatpush2.bf16.msra.mxu0 %v8432
  %9727 = vmatprep.subr.bf16.mxu0 %v8426
  %9728 = vmatpush2.bf16.msra.mxu0 %v8425
  %9729 = vmatprep.subr.bf16.mxu0 %v8419
  %9730 = vmatpush2.bf16.msra.mxu0 %v8418
  %9731 = vmatprep.subr.bf16.mxu0 %v8412
  %9732 = vmatpush2.bf16.msra.mxu0 %v8411
  %9733 = vmatprep.mubr.bf16.mxu0 %v8802
  %9734 = vmatmul.mubr.bf16.gmra.mxu0 %v8801
  %v9735 = vpop.f32.mrf.mxu0
  %v9736 = vadd.f32 0.0, %v9735
  %v9737 = vpop.f32.mrf.mxu0
  %v9738 = vadd.f32 0.0, %v9737
  %v9739 = vpop.f32.mrf.mxu0
  %v9740 = vadd.f32 0.0, %v9739
  %v9741 = vpop.f32.mrf.mxu0
  %v9742 = vadd.f32 0.0, %v9741
  %9743 = vmatprep.mubr.bf16.mxu0 %v8810
  %9744 = vmatmul.mubr.bf16.gmra.mxu0 %v8809
  %v9745 = vpop.f32.mrf.mxu0
  %v9746 = vadd.f32 0.0, %v9745
  %v9747 = vpop.f32.mrf.mxu0
  %v9748 = vadd.f32 0.0, %v9747
  %v9749 = vpop.f32.mrf.mxu0
  %v9750 = vadd.f32 0.0, %v9749
  %v9751 = vpop.f32.mrf.mxu0
  %v9752 = vadd.f32 0.0, %v9751
  %9753 = vmatprep.mubr.bf16.mxu0 %v8818
  %9754 = vmatmul.mubr.bf16.gmra.mxu0 %v8817
  %v9755 = vpop.f32.mrf.mxu0
  %v9756 = vadd.f32 0.0, %v9755
  %v9757 = vpop.f32.mrf.mxu0
  %v9758 = vadd.f32 0.0, %v9757
  %v9759 = vpop.f32.mrf.mxu0
  %v9760 = vadd.f32 0.0, %v9759
  %v9761 = vpop.f32.mrf.mxu0
  %v9762 = vadd.f32 0.0, %v9761
  %9763 = vmatprep.mubr.bf16.mxu0 %v8826
  %9764 = vmatmul.mubr.bf16.gmra.mxu0 %v8825
  %v9765 = vpop.f32.mrf.mxu0
  %v9766 = vadd.f32 0.0, %v9765
  %v9767 = vpop.f32.mrf.mxu0
  %v9768 = vadd.f32 0.0, %v9767
  %v9769 = vpop.f32.mrf.mxu0
  %v9770 = vadd.f32 0.0, %v9769
  %v9771 = vpop.f32.mrf.mxu0
  %v9772 = vadd.f32 0.0, %v9771
  %9773 = vmatprep.mubr.bf16.mxu0 %v8834
  %9774 = vmatmul.mubr.bf16.gmra.mxu0 %v8833
  %v9775 = vpop.f32.mrf.mxu0
  %v9776 = vadd.f32 0.0, %v9775
  %v9777 = vpop.f32.mrf.mxu0
  %v9778 = vadd.f32 0.0, %v9777
  %v9779 = vpop.f32.mrf.mxu0
  %v9780 = vadd.f32 0.0, %v9779
  %v9781 = vpop.f32.mrf.mxu0
  %v9782 = vadd.f32 0.0, %v9781
  %9783 = vmatprep.mubr.bf16.mxu0 %v8842
  %9784 = vmatmul.mubr.bf16.gmra.mxu0 %v8841
  %v9785 = vpop.f32.mrf.mxu0
  %v9786 = vadd.f32 0.0, %v9785
  %v9787 = vpop.f32.mrf.mxu0
  %v9788 = vadd.f32 0.0, %v9787
  %v9789 = vpop.f32.mrf.mxu0
  %v9790 = vadd.f32 0.0, %v9789
  %v9791 = vpop.f32.mrf.mxu0
  %v9792 = vadd.f32 0.0, %v9791
  %9793 = vmatprep.mubr.bf16.mxu0 %v8850
  %9794 = vmatmul.mubr.bf16.gmra.mxu0 %v8849
  %v9795 = vpop.f32.mrf.mxu0
  %v9796 = vadd.f32 0.0, %v9795
  %v9797 = vpop.f32.mrf.mxu0
  %v9798 = vadd.f32 0.0, %v9797
  %v9799 = vpop.f32.mrf.mxu0
  %v9800 = vadd.f32 0.0, %v9799
  %v9801 = vpop.f32.mrf.mxu0
  %v9802 = vadd.f32 0.0, %v9801
  %9803 = vmatprep.mubr.bf16.mxu0 %v8858
  %9804 = vmatmul.mubr.bf16.gmra.mxu0 %v8857
  %v9805 = vpop.f32.mrf.mxu0
  %v9806 = vadd.f32 0.0, %v9805
  %v9807 = vpop.f32.mrf.mxu0
  %v9808 = vadd.f32 0.0, %v9807
  %v9809 = vpop.f32.mrf.mxu0
  %v9810 = vadd.f32 0.0, %v9809
  %v9811 = vpop.f32.mrf.mxu0
  %v9812 = vadd.f32 0.0, %v9811
  %9813 = vmatprep.mubr.bf16.mxu0 %v8866
  %9814 = vmatmul.mubr.bf16.gmra.mxu0 %v8865
  %v9815 = vpop.f32.mrf.mxu0
  %v9816 = vadd.f32 0.0, %v9815
  %v9817 = vpop.f32.mrf.mxu0
  %v9818 = vadd.f32 0.0, %v9817
  %v9819 = vpop.f32.mrf.mxu0
  %v9820 = vadd.f32 0.0, %v9819
  %v9821 = vpop.f32.mrf.mxu0
  %v9822 = vadd.f32 0.0, %v9821
  %9823 = vmatprep.mubr.bf16.mxu0 %v8874
  %9824 = vmatmul.mubr.bf16.gmra.mxu0 %v8873
  %v9825 = vpop.f32.mrf.mxu0
  %v9826 = vadd.f32 0.0, %v9825
  %v9827 = vpop.f32.mrf.mxu0
  %v9828 = vadd.f32 0.0, %v9827
  %v9829 = vpop.f32.mrf.mxu0
  %v9830 = vadd.f32 0.0, %v9829
  %v9831 = vpop.f32.mrf.mxu0
  %v9832 = vadd.f32 0.0, %v9831
  %9833 = vmatprep.mubr.bf16.mxu0 %v8882
  %9834 = vmatmul.mubr.bf16.gmra.mxu0 %v8881
  %v9835 = vpop.f32.mrf.mxu0
  %v9836 = vadd.f32 0.0, %v9835
  %v9837 = vpop.f32.mrf.mxu0
  %v9838 = vadd.f32 0.0, %v9837
  %v9839 = vpop.f32.mrf.mxu0
  %v9840 = vadd.f32 0.0, %v9839
  %v9841 = vpop.f32.mrf.mxu0
  %v9842 = vadd.f32 0.0, %v9841
  %9843 = vmatprep.mubr.bf16.mxu0 %v8890
  %9844 = vmatmul.mubr.bf16.gmra.mxu0 %v8889
  %v9845 = vpop.f32.mrf.mxu0
  %v9846 = vadd.f32 0.0, %v9845
  %v9847 = vpop.f32.mrf.mxu0
  %v9848 = vadd.f32 0.0, %v9847
  %v9849 = vpop.f32.mrf.mxu0
  %v9850 = vadd.f32 0.0, %v9849
  %v9851 = vpop.f32.mrf.mxu0
  %v9852 = vadd.f32 0.0, %v9851
  %9853 = vmatprep.mubr.bf16.mxu0 %v8898
  %9854 = vmatmul.mubr.bf16.gmra.mxu0 %v8897
  %v9855 = vpop.f32.mrf.mxu0
  %v9856 = vadd.f32 0.0, %v9855
  %v9857 = vpop.f32.mrf.mxu0
  %v9858 = vadd.f32 0.0, %v9857
  %v9859 = vpop.f32.mrf.mxu0
  %v9860 = vadd.f32 0.0, %v9859
  %v9861 = vpop.f32.mrf.mxu0
  %v9862 = vadd.f32 0.0, %v9861
  %9863 = vmatprep.mubr.bf16.mxu0 %v8906
  %9864 = vmatmul.mubr.bf16.gmra.mxu0 %v8905
  %v9865 = vpop.f32.mrf.mxu0
  %v9866 = vadd.f32 0.0, %v9865
  %v9867 = vpop.f32.mrf.mxu0
  %v9868 = vadd.f32 0.0, %v9867
  %v9869 = vpop.f32.mrf.mxu0
  %v9870 = vadd.f32 0.0, %v9869
  %v9871 = vpop.f32.mrf.mxu0
  %v9872 = vadd.f32 0.0, %v9871
  %9873 = vmatprep.mubr.bf16.mxu0 %v8914
  %9874 = vmatmul.mubr.bf16.gmra.mxu0 %v8913
  %v9875 = vpop.f32.mrf.mxu0
  %v9876 = vadd.f32 0.0, %v9875
  %v9877 = vpop.f32.mrf.mxu0
  %v9878 = vadd.f32 0.0, %v9877
  %v9879 = vpop.f32.mrf.mxu0
  %v9880 = vadd.f32 0.0, %v9879
  %v9881 = vpop.f32.mrf.mxu0
  %v9882 = vadd.f32 0.0, %v9881
  %9883 = vmatprep.mubr.bf16.mxu0 %v8922
  %9884 = vmatmul.mubr.bf16.gmra.mxu0 %v8921
  %v9885 = vpop.f32.mrf.mxu0
  %v9886 = vadd.f32 0.0, %v9885
  %v9887 = vpop.f32.mrf.mxu0
  %v9888 = vadd.f32 0.0, %v9887
  %v9889 = vpop.f32.mrf.mxu0
  %v9890 = vadd.f32 0.0, %v9889
  %v9891 = vpop.f32.mrf.mxu0
  %v9892 = vadd.f32 0.0, %v9891
  %9893 = vdwg.mxu0
  %9894 = vmatprep.subr.bf16.mxu0 %v8517
  %9895 = vmatpush1.bf16.msra.mxu0 %v8516
  %9896 = vmatprep.subr.bf16.mxu0 %v8510
  %9897 = vmatpush1.bf16.msra.mxu0 %v8509
  %9898 = vmatprep.subr.bf16.mxu0 %v8503
  %9899 = vmatpush1.bf16.msra.mxu0 %v8502
  %9900 = vmatprep.subr.bf16.mxu0 %v8496
  %9901 = vmatpush1.bf16.msra.mxu0 %v8495
  %9902 = vmatprep.subr.bf16.mxu0 %v8489
  %9903 = vmatpush1.bf16.msra.mxu0 %v8488
  %9904 = vmatprep.subr.bf16.mxu0 %v8482
  %9905 = vmatpush1.bf16.msra.mxu0 %v8481
  %9906 = vmatprep.subr.bf16.mxu0 %v8475
  %9907 = vmatpush1.bf16.msra.mxu0 %v8474
  %9908 = vmatprep.subr.bf16.mxu0 %v8468
  %9909 = vmatpush1.bf16.msra.mxu0 %v8467
  %9910 = vmatprep.subr.bf16.mxu0 %v8573
  %9911 = vmatpush2.bf16.msra.mxu0 %v8572
  %9912 = vmatprep.subr.bf16.mxu0 %v8566
  %9913 = vmatpush2.bf16.msra.mxu0 %v8565
  %9914 = vmatprep.subr.bf16.mxu0 %v8559
  %9915 = vmatpush2.bf16.msra.mxu0 %v8558
  %9916 = vmatprep.subr.bf16.mxu0 %v8552
  %9917 = vmatpush2.bf16.msra.mxu0 %v8551
  %9918 = vmatprep.subr.bf16.mxu0 %v8545
  %9919 = vmatpush2.bf16.msra.mxu0 %v8544
  %9920 = vmatprep.subr.bf16.mxu0 %v8538
  %9921 = vmatpush2.bf16.msra.mxu0 %v8537
  %9922 = vmatprep.subr.bf16.mxu0 %v8531
  %9923 = vmatpush2.bf16.msra.mxu0 %v8530
  %9924 = vmatprep.subr.bf16.mxu0 %v8524
  %9925 = vmatpush2.bf16.msra.mxu0 %v8523
  %9926 = vmatprep.mubr.bf16.mxu0 %v8804
  %9927 = vmatmul.mubr.bf16.gmra.mxu0 %v8803
  %v9928 = vpop.f32.mrf.mxu0
  %v9929 = vadd.f32 %v9736, %v9928
  %v9930 = vpop.f32.mrf.mxu0
  %v9931 = vadd.f32 %v9738, %v9930
  %v9932 = vpop.f32.mrf.mxu0
  %v9933 = vadd.f32 %v9740, %v9932
  %v9934 = vpop.f32.mrf.mxu0
  %v9935 = vadd.f32 %v9742, %v9934
  %9936 = vmatprep.mubr.bf16.mxu0 %v8812
  %9937 = vmatmul.mubr.bf16.gmra.mxu0 %v8811
  %v9938 = vpop.f32.mrf.mxu0
  %v9939 = vadd.f32 %v9746, %v9938
  %v9940 = vpop.f32.mrf.mxu0
  %v9941 = vadd.f32 %v9748, %v9940
  %v9942 = vpop.f32.mrf.mxu0
  %v9943 = vadd.f32 %v9750, %v9942
  %v9944 = vpop.f32.mrf.mxu0
  %v9945 = vadd.f32 %v9752, %v9944
  %9946 = vmatprep.mubr.bf16.mxu0 %v8820
  %9947 = vmatmul.mubr.bf16.gmra.mxu0 %v8819
  %v9948 = vpop.f32.mrf.mxu0
  %v9949 = vadd.f32 %v9756, %v9948
  %v9950 = vpop.f32.mrf.mxu0
  %v9951 = vadd.f32 %v9758, %v9950
  %v9952 = vpop.f32.mrf.mxu0
  %v9953 = vadd.f32 %v9760, %v9952
  %v9954 = vpop.f32.mrf.mxu0
  %v9955 = vadd.f32 %v9762, %v9954
  %9956 = vmatprep.mubr.bf16.mxu0 %v8828
  %9957 = vmatmul.mubr.bf16.gmra.mxu0 %v8827
  %v9958 = vpop.f32.mrf.mxu0
  %v9959 = vadd.f32 %v9766, %v9958
  %v9960 = vpop.f32.mrf.mxu0
  %v9961 = vadd.f32 %v9768, %v9960
  %v9962 = vpop.f32.mrf.mxu0
  %v9963 = vadd.f32 %v9770, %v9962
  %v9964 = vpop.f32.mrf.mxu0
  %v9965 = vadd.f32 %v9772, %v9964
  %9966 = vmatprep.mubr.bf16.mxu0 %v8836
  %9967 = vmatmul.mubr.bf16.gmra.mxu0 %v8835
  %v9968 = vpop.f32.mrf.mxu0
  %v9969 = vadd.f32 %v9776, %v9968
  %v9970 = vpop.f32.mrf.mxu0
  %v9971 = vadd.f32 %v9778, %v9970
  %v9972 = vpop.f32.mrf.mxu0
  %v9973 = vadd.f32 %v9780, %v9972
  %v9974 = vpop.f32.mrf.mxu0
  %v9975 = vadd.f32 %v9782, %v9974
  %9976 = vmatprep.mubr.bf16.mxu0 %v8844
  %9977 = vmatmul.mubr.bf16.gmra.mxu0 %v8843
  %v9978 = vpop.f32.mrf.mxu0
  %v9979 = vadd.f32 %v9786, %v9978
  %v9980 = vpop.f32.mrf.mxu0
  %v9981 = vadd.f32 %v9788, %v9980
  %v9982 = vpop.f32.mrf.mxu0
  %v9983 = vadd.f32 %v9790, %v9982
  %v9984 = vpop.f32.mrf.mxu0
  %v9985 = vadd.f32 %v9792, %v9984
  %9986 = vmatprep.mubr.bf16.mxu0 %v8852
  %9987 = vmatmul.mubr.bf16.gmra.mxu0 %v8851
  %v9988 = vpop.f32.mrf.mxu0
  %v9989 = vadd.f32 %v9796, %v9988
  %v9990 = vpop.f32.mrf.mxu0
  %v9991 = vadd.f32 %v9798, %v9990
  %v9992 = vpop.f32.mrf.mxu0
  %v9993 = vadd.f32 %v9800, %v9992
  %v9994 = vpop.f32.mrf.mxu0
  %v9995 = vadd.f32 %v9802, %v9994
  %9996 = vmatprep.mubr.bf16.mxu0 %v8860
  %9997 = vmatmul.mubr.bf16.gmra.mxu0 %v8859
  %v9998 = vpop.f32.mrf.mxu0
  %v9999 = vadd.f32 %v9806, %v9998
  %v10000 = vpop.f32.mrf.mxu0
  %v10001 = vadd.f32 %v9808, %v10000
  %v10002 = vpop.f32.mrf.mxu0
  %v10003 = vadd.f32 %v9810, %v10002
  %v10004 = vpop.f32.mrf.mxu0
  %v10005 = vadd.f32 %v9812, %v10004
  %10006 = vmatprep.mubr.bf16.mxu0 %v8868
  %10007 = vmatmul.mubr.bf16.gmra.mxu0 %v8867
  %v10008 = vpop.f32.mrf.mxu0
  %v10009 = vadd.f32 %v9816, %v10008
  %v10010 = vpop.f32.mrf.mxu0
  %v10011 = vadd.f32 %v9818, %v10010
  %v10012 = vpop.f32.mrf.mxu0
  %v10013 = vadd.f32 %v9820, %v10012
  %v10014 = vpop.f32.mrf.mxu0
  %v10015 = vadd.f32 %v9822, %v10014
  %10016 = vmatprep.mubr.bf16.mxu0 %v8876
  %10017 = vmatmul.mubr.bf16.gmra.mxu0 %v8875
  %v10018 = vpop.f32.mrf.mxu0
  %v10019 = vadd.f32 %v9826, %v10018
  %v10020 = vpop.f32.mrf.mxu0
  %v10021 = vadd.f32 %v9828, %v10020
  %v10022 = vpop.f32.mrf.mxu0
  %v10023 = vadd.f32 %v9830, %v10022
  %v10024 = vpop.f32.mrf.mxu0
  %v10025 = vadd.f32 %v9832, %v10024
  %10026 = vmatprep.mubr.bf16.mxu0 %v8884
  %10027 = vmatmul.mubr.bf16.gmra.mxu0 %v8883
  %v10028 = vpop.f32.mrf.mxu0
  %v10029 = vadd.f32 %v9836, %v10028
  %v10030 = vpop.f32.mrf.mxu0
  %v10031 = vadd.f32 %v9838, %v10030
  %v10032 = vpop.f32.mrf.mxu0
  %v10033 = vadd.f32 %v9840, %v10032
  %v10034 = vpop.f32.mrf.mxu0
  %v10035 = vadd.f32 %v9842, %v10034
  %10036 = vmatprep.mubr.bf16.mxu0 %v8892
  %10037 = vmatmul.mubr.bf16.gmra.mxu0 %v8891
  %v10038 = vpop.f32.mrf.mxu0
  %v10039 = vadd.f32 %v9846, %v10038
  %v10040 = vpop.f32.mrf.mxu0
  %v10041 = vadd.f32 %v9848, %v10040
  %v10042 = vpop.f32.mrf.mxu0
  %v10043 = vadd.f32 %v9850, %v10042
  %v10044 = vpop.f32.mrf.mxu0
  %v10045 = vadd.f32 %v9852, %v10044
  %10046 = vmatprep.mubr.bf16.mxu0 %v8900
  %10047 = vmatmul.mubr.bf16.gmra.mxu0 %v8899
  %v10048 = vpop.f32.mrf.mxu0
  %v10049 = vadd.f32 %v9856, %v10048
  %v10050 = vpop.f32.mrf.mxu0
  %v10051 = vadd.f32 %v9858, %v10050
  %v10052 = vpop.f32.mrf.mxu0
  %v10053 = vadd.f32 %v9860, %v10052
  %v10054 = vpop.f32.mrf.mxu0
  %v10055 = vadd.f32 %v9862, %v10054
  %10056 = vmatprep.mubr.bf16.mxu0 %v8908
  %10057 = vmatmul.mubr.bf16.gmra.mxu0 %v8907
  %v10058 = vpop.f32.mrf.mxu0
  %v10059 = vadd.f32 %v9866, %v10058
  %v10060 = vpop.f32.mrf.mxu0
  %v10061 = vadd.f32 %v9868, %v10060
  %v10062 = vpop.f32.mrf.mxu0
  %v10063 = vadd.f32 %v9870, %v10062
  %v10064 = vpop.f32.mrf.mxu0
  %v10065 = vadd.f32 %v9872, %v10064
  %10066 = vmatprep.mubr.bf16.mxu0 %v8916
  %10067 = vmatmul.mubr.bf16.gmra.mxu0 %v8915
  %v10068 = vpop.f32.mrf.mxu0
  %v10069 = vadd.f32 %v9876, %v10068
  %v10070 = vpop.f32.mrf.mxu0
  %v10071 = vadd.f32 %v9878, %v10070
  %v10072 = vpop.f32.mrf.mxu0
  %v10073 = vadd.f32 %v9880, %v10072
  %v10074 = vpop.f32.mrf.mxu0
  %v10075 = vadd.f32 %v9882, %v10074
  %10076 = vmatprep.mubr.bf16.mxu0 %v8924
  %10077 = vmatmul.mubr.bf16.gmra.mxu0 %v8923
  %v10078 = vpop.f32.mrf.mxu0
  %v10079 = vadd.f32 %v9886, %v10078
  %v10080 = vpop.f32.mrf.mxu0
  %v10081 = vadd.f32 %v9888, %v10080
  %v10082 = vpop.f32.mrf.mxu0
  %v10083 = vadd.f32 %v9890, %v10082
  %v10084 = vpop.f32.mrf.mxu0
  %v10085 = vadd.f32 %v9892, %v10084
  %10086 = vdwg.mxu0
  %10087 = vmatprep.subr.bf16.mxu0 %v8629
  %10088 = vmatpush1.bf16.msra.mxu0 %v8628
  %10089 = vmatprep.subr.bf16.mxu0 %v8622
  %10090 = vmatpush1.bf16.msra.mxu0 %v8621
  %10091 = vmatprep.subr.bf16.mxu0 %v8615
  %10092 = vmatpush1.bf16.msra.mxu0 %v8614
  %10093 = vmatprep.subr.bf16.mxu0 %v8608
  %10094 = vmatpush1.bf16.msra.mxu0 %v8607
  %10095 = vmatprep.subr.bf16.mxu0 %v8601
  %10096 = vmatpush1.bf16.msra.mxu0 %v8600
  %10097 = vmatprep.subr.bf16.mxu0 %v8594
  %10098 = vmatpush1.bf16.msra.mxu0 %v8593
  %10099 = vmatprep.subr.bf16.mxu0 %v8587
  %10100 = vmatpush1.bf16.msra.mxu0 %v8586
  %10101 = vmatprep.subr.bf16.mxu0 %v8580
  %10102 = vmatpush1.bf16.msra.mxu0 %v8579
  %10103 = vmatprep.subr.bf16.mxu0 %v8685
  %10104 = vmatpush2.bf16.msra.mxu0 %v8684
  %10105 = vmatprep.subr.bf16.mxu0 %v8678
  %10106 = vmatpush2.bf16.msra.mxu0 %v8677
  %10107 = vmatprep.subr.bf16.mxu0 %v8671
  %10108 = vmatpush2.bf16.msra.mxu0 %v8670
  %10109 = vmatprep.subr.bf16.mxu0 %v8664
  %10110 = vmatpush2.bf16.msra.mxu0 %v8663
  %10111 = vmatprep.subr.bf16.mxu0 %v8657
  %10112 = vmatpush2.bf16.msra.mxu0 %v8656
  %10113 = vmatprep.subr.bf16.mxu0 %v8650
  %10114 = vmatpush2.bf16.msra.mxu0 %v8649
  %10115 = vmatprep.subr.bf16.mxu0 %v8643
  %10116 = vmatpush2.bf16.msra.mxu0 %v8642
  %10117 = vmatprep.subr.bf16.mxu0 %v8636
  %10118 = vmatpush2.bf16.msra.mxu0 %v8635
  %10119 = vmatprep.mubr.bf16.mxu0 %v8806
  %10120 = vmatmul.mubr.bf16.gmra.mxu0 %v8805
  %v10121 = vpop.f32.mrf.mxu0
  %v10122 = vadd.f32 %v9929, %v10121
  %v10123 = vpop.f32.mrf.mxu0
  %v10124 = vadd.f32 %v9931, %v10123
  %v10125 = vpop.f32.mrf.mxu0
  %v10126 = vadd.f32 %v9933, %v10125
  %v10127 = vpop.f32.mrf.mxu0
  %v10128 = vadd.f32 %v9935, %v10127
  %10129 = vmatprep.mubr.bf16.mxu0 %v8814
  %10130 = vmatmul.mubr.bf16.gmra.mxu0 %v8813
  %v10131 = vpop.f32.mrf.mxu0
  %v10132 = vadd.f32 %v9939, %v10131
  %v10133 = vpop.f32.mrf.mxu0
  %v10134 = vadd.f32 %v9941, %v10133
  %v10135 = vpop.f32.mrf.mxu0
  %v10136 = vadd.f32 %v9943, %v10135
  %v10137 = vpop.f32.mrf.mxu0
  %v10138 = vadd.f32 %v9945, %v10137
  %10139 = vmatprep.mubr.bf16.mxu0 %v8822
  %10140 = vmatmul.mubr.bf16.gmra.mxu0 %v8821
  %v10141 = vpop.f32.mrf.mxu0
  %v10142 = vadd.f32 %v9949, %v10141
  %v10143 = vpop.f32.mrf.mxu0
  %v10144 = vadd.f32 %v9951, %v10143
  %v10145 = vpop.f32.mrf.mxu0
  %v10146 = vadd.f32 %v9953, %v10145
  %v10147 = vpop.f32.mrf.mxu0
  %v10148 = vadd.f32 %v9955, %v10147
  %10149 = vmatprep.mubr.bf16.mxu0 %v8830
  %10150 = vmatmul.mubr.bf16.gmra.mxu0 %v8829
  %v10151 = vpop.f32.mrf.mxu0
  %v10152 = vadd.f32 %v9959, %v10151
  %v10153 = vpop.f32.mrf.mxu0
  %v10154 = vadd.f32 %v9961, %v10153
  %v10155 = vpop.f32.mrf.mxu0
  %v10156 = vadd.f32 %v9963, %v10155
  %v10157 = vpop.f32.mrf.mxu0
  %v10158 = vadd.f32 %v9965, %v10157
  %10159 = vmatprep.mubr.bf16.mxu0 %v8838
  %10160 = vmatmul.mubr.bf16.gmra.mxu0 %v8837
  %v10161 = vpop.f32.mrf.mxu0
  %v10162 = vadd.f32 %v9969, %v10161
  %v10163 = vpop.f32.mrf.mxu0
  %v10164 = vadd.f32 %v9971, %v10163
  %v10165 = vpop.f32.mrf.mxu0
  %v10166 = vadd.f32 %v9973, %v10165
  %v10167 = vpop.f32.mrf.mxu0
  %v10168 = vadd.f32 %v9975, %v10167
  %10169 = vmatprep.mubr.bf16.mxu0 %v8846
  %10170 = vmatmul.mubr.bf16.gmra.mxu0 %v8845
  %v10171 = vpop.f32.mrf.mxu0
  %v10172 = vadd.f32 %v9979, %v10171
  %v10173 = vpop.f32.mrf.mxu0
  %v10174 = vadd.f32 %v9981, %v10173
  %v10175 = vpop.f32.mrf.mxu0
  %v10176 = vadd.f32 %v9983, %v10175
  %v10177 = vpop.f32.mrf.mxu0
  %v10178 = vadd.f32 %v9985, %v10177
  %10179 = vmatprep.mubr.bf16.mxu0 %v8854
  %10180 = vmatmul.mubr.bf16.gmra.mxu0 %v8853
  %v10181 = vpop.f32.mrf.mxu0
  %v10182 = vadd.f32 %v9989, %v10181
  %v10183 = vpop.f32.mrf.mxu0
  %v10184 = vadd.f32 %v9991, %v10183
  %v10185 = vpop.f32.mrf.mxu0
  %v10186 = vadd.f32 %v9993, %v10185
  %v10187 = vpop.f32.mrf.mxu0
  %v10188 = vadd.f32 %v9995, %v10187
  %10189 = vmatprep.mubr.bf16.mxu0 %v8862
  %10190 = vmatmul.mubr.bf16.gmra.mxu0 %v8861
  %v10191 = vpop.f32.mrf.mxu0
  %v10192 = vadd.f32 %v9999, %v10191
  %v10193 = vpop.f32.mrf.mxu0
  %v10194 = vadd.f32 %v10001, %v10193
  %v10195 = vpop.f32.mrf.mxu0
  %v10196 = vadd.f32 %v10003, %v10195
  %v10197 = vpop.f32.mrf.mxu0
  %v10198 = vadd.f32 %v10005, %v10197
  %10199 = vmatprep.mubr.bf16.mxu0 %v8870
  %10200 = vmatmul.mubr.bf16.gmra.mxu0 %v8869
  %v10201 = vpop.f32.mrf.mxu0
  %v10202 = vadd.f32 %v10009, %v10201
  %v10203 = vpop.f32.mrf.mxu0
  %v10204 = vadd.f32 %v10011, %v10203
  %v10205 = vpop.f32.mrf.mxu0
  %v10206 = vadd.f32 %v10013, %v10205
  %v10207 = vpop.f32.mrf.mxu0
  %v10208 = vadd.f32 %v10015, %v10207
  %10209 = vmatprep.mubr.bf16.mxu0 %v8878
  %10210 = vmatmul.mubr.bf16.gmra.mxu0 %v8877
  %v10211 = vpop.f32.mrf.mxu0
  %v10212 = vadd.f32 %v10019, %v10211
  %v10213 = vpop.f32.mrf.mxu0
  %v10214 = vadd.f32 %v10021, %v10213
  %v10215 = vpop.f32.mrf.mxu0
  %v10216 = vadd.f32 %v10023, %v10215
  %v10217 = vpop.f32.mrf.mxu0
  %v10218 = vadd.f32 %v10025, %v10217
  %10219 = vmatprep.mubr.bf16.mxu0 %v8886
  %10220 = vmatmul.mubr.bf16.gmra.mxu0 %v8885
  %v10221 = vpop.f32.mrf.mxu0
  %v10222 = vadd.f32 %v10029, %v10221
  %v10223 = vpop.f32.mrf.mxu0
  %v10224 = vadd.f32 %v10031, %v10223
  %v10225 = vpop.f32.mrf.mxu0
  %v10226 = vadd.f32 %v10033, %v10225
  %v10227 = vpop.f32.mrf.mxu0
  %v10228 = vadd.f32 %v10035, %v10227
  %10229 = vmatprep.mubr.bf16.mxu0 %v8894
  %10230 = vmatmul.mubr.bf16.gmra.mxu0 %v8893
  %v10231 = vpop.f32.mrf.mxu0
  %v10232 = vadd.f32 %v10039, %v10231
  %v10233 = vpop.f32.mrf.mxu0
  %v10234 = vadd.f32 %v10041, %v10233
  %v10235 = vpop.f32.mrf.mxu0
  %v10236 = vadd.f32 %v10043, %v10235
  %v10237 = vpop.f32.mrf.mxu0
  %v10238 = vadd.f32 %v10045, %v10237
  %10239 = vmatprep.mubr.bf16.mxu0 %v8902
  %10240 = vmatmul.mubr.bf16.gmra.mxu0 %v8901
  %v10241 = vpop.f32.mrf.mxu0
  %v10242 = vadd.f32 %v10049, %v10241
  %v10243 = vpop.f32.mrf.mxu0
  %v10244 = vadd.f32 %v10051, %v10243
  %v10245 = vpop.f32.mrf.mxu0
  %v10246 = vadd.f32 %v10053, %v10245
  %v10247 = vpop.f32.mrf.mxu0
  %v10248 = vadd.f32 %v10055, %v10247
  %10249 = vmatprep.mubr.bf16.mxu0 %v8910
  %10250 = vmatmul.mubr.bf16.gmra.mxu0 %v8909
  %v10251 = vpop.f32.mrf.mxu0
  %v10252 = vadd.f32 %v10059, %v10251
  %v10253 = vpop.f32.mrf.mxu0
  %v10254 = vadd.f32 %v10061, %v10253
  %v10255 = vpop.f32.mrf.mxu0
  %v10256 = vadd.f32 %v10063, %v10255
  %v10257 = vpop.f32.mrf.mxu0
  %v10258 = vadd.f32 %v10065, %v10257
  %10259 = vmatprep.mubr.bf16.mxu0 %v8918
  %10260 = vmatmul.mubr.bf16.gmra.mxu0 %v8917
  %v10261 = vpop.f32.mrf.mxu0
  %v10262 = vadd.f32 %v10069, %v10261
  %v10263 = vpop.f32.mrf.mxu0
  %v10264 = vadd.f32 %v10071, %v10263
  %v10265 = vpop.f32.mrf.mxu0
  %v10266 = vadd.f32 %v10073, %v10265
  %v10267 = vpop.f32.mrf.mxu0
  %v10268 = vadd.f32 %v10075, %v10267
  %10269 = vmatprep.mubr.bf16.mxu0 %v8926
  %10270 = vmatmul.mubr.bf16.gmra.mxu0 %v8925
  %v10271 = vpop.f32.mrf.mxu0
  %v10272 = vadd.f32 %v10079, %v10271
  %v10273 = vpop.f32.mrf.mxu0
  %v10274 = vadd.f32 %v10081, %v10273
  %v10275 = vpop.f32.mrf.mxu0
  %v10276 = vadd.f32 %v10083, %v10275
  %v10277 = vpop.f32.mrf.mxu0
  %v10278 = vadd.f32 %v10085, %v10277
  %10279 = vdwg.mxu0
  %10280 = vmatprep.subr.bf16.mxu0 %v8741
  %10281 = vmatpush1.bf16.msra.mxu0 %v8740
  %10282 = vmatprep.subr.bf16.mxu0 %v8734
  %10283 = vmatpush1.bf16.msra.mxu0 %v8733
  %10284 = vmatprep.subr.bf16.mxu0 %v8727
  %10285 = vmatpush1.bf16.msra.mxu0 %v8726
  %10286 = vmatprep.subr.bf16.mxu0 %v8720
  %10287 = vmatpush1.bf16.msra.mxu0 %v8719
  %10288 = vmatprep.subr.bf16.mxu0 %v8713
  %10289 = vmatpush1.bf16.msra.mxu0 %v8712
  %10290 = vmatprep.subr.bf16.mxu0 %v8706
  %10291 = vmatpush1.bf16.msra.mxu0 %v8705
  %10292 = vmatprep.subr.bf16.mxu0 %v8699
  %10293 = vmatpush1.bf16.msra.mxu0 %v8698
  %10294 = vmatprep.subr.bf16.mxu0 %v8692
  %10295 = vmatpush1.bf16.msra.mxu0 %v8691
  %10296 = vmatprep.subr.bf16.mxu0 %v8797
  %10297 = vmatpush2.bf16.msra.mxu0 %v8796
  %10298 = vmatprep.subr.bf16.mxu0 %v8790
  %10299 = vmatpush2.bf16.msra.mxu0 %v8789
  %10300 = vmatprep.subr.bf16.mxu0 %v8783
  %10301 = vmatpush2.bf16.msra.mxu0 %v8782
  %10302 = vmatprep.subr.bf16.mxu0 %v8776
  %10303 = vmatpush2.bf16.msra.mxu0 %v8775
  %10304 = vmatprep.subr.bf16.mxu0 %v8769
  %10305 = vmatpush2.bf16.msra.mxu0 %v8768
  %10306 = vmatprep.subr.bf16.mxu0 %v8762
  %10307 = vmatpush2.bf16.msra.mxu0 %v8761
  %10308 = vmatprep.subr.bf16.mxu0 %v8755
  %10309 = vmatpush2.bf16.msra.mxu0 %v8754
  %10310 = vmatprep.subr.bf16.mxu0 %v8748
  %10311 = vmatpush2.bf16.msra.mxu0 %v8747
  %10312 = vmatprep.mubr.bf16.mxu0 %v8808
  %10313 = vmatmul.mubr.bf16.gmra.mxu0 %v8807
  %v10314 = vpop.f32.mrf.mxu0
  %v10315 = vadd.f32 %v10122, %v10314
  %v10316 = vpop.f32.mrf.mxu0
  %v10317 = vadd.f32 %v10124, %v10316
  %v10318 = vpop.f32.mrf.mxu0
  %v10319 = vadd.f32 %v10126, %v10318
  %v10320 = vpop.f32.mrf.mxu0
  %v10321 = vadd.f32 %v10128, %v10320
  %10322 = vmatprep.mubr.bf16.mxu0 %v8816
  %10323 = vmatmul.mubr.bf16.gmra.mxu0 %v8815
  %v10324 = vpop.f32.mrf.mxu0
  %v10325 = vadd.f32 %v10132, %v10324
  %v10326 = vpop.f32.mrf.mxu0
  %v10327 = vadd.f32 %v10134, %v10326
  %v10328 = vpop.f32.mrf.mxu0
  %v10329 = vadd.f32 %v10136, %v10328
  %v10330 = vpop.f32.mrf.mxu0
  %v10331 = vadd.f32 %v10138, %v10330
  %10332 = vmatprep.mubr.bf16.mxu0 %v8824
  %10333 = vmatmul.mubr.bf16.gmra.mxu0 %v8823
  %v10334 = vpop.f32.mrf.mxu0
  %v10335 = vadd.f32 %v10142, %v10334
  %v10336 = vpop.f32.mrf.mxu0
  %v10337 = vadd.f32 %v10144, %v10336
  %v10338 = vpop.f32.mrf.mxu0
  %v10339 = vadd.f32 %v10146, %v10338
  %v10340 = vpop.f32.mrf.mxu0
  %v10341 = vadd.f32 %v10148, %v10340
  %10342 = vmatprep.mubr.bf16.mxu0 %v8832
  %10343 = vmatmul.mubr.bf16.gmra.mxu0 %v8831
  %v10344 = vpop.f32.mrf.mxu0
  %v10345 = vadd.f32 %v10152, %v10344
  %v10346 = vpop.f32.mrf.mxu0
  %v10347 = vadd.f32 %v10154, %v10346
  %v10348 = vpop.f32.mrf.mxu0
  %v10349 = vadd.f32 %v10156, %v10348
  %v10350 = vpop.f32.mrf.mxu0
  %v10351 = vadd.f32 %v10158, %v10350
  %10352 = vmatprep.mubr.bf16.mxu0 %v8840
  %10353 = vmatmul.mubr.bf16.gmra.mxu0 %v8839
  %v10354 = vpop.f32.mrf.mxu0
  %v10355 = vadd.f32 %v10162, %v10354
  %v10356 = vpop.f32.mrf.mxu0
  %v10357 = vadd.f32 %v10164, %v10356
  %v10358 = vpop.f32.mrf.mxu0
  %v10359 = vadd.f32 %v10166, %v10358
  %v10360 = vpop.f32.mrf.mxu0
  %v10361 = vadd.f32 %v10168, %v10360
  %10362 = vmatprep.mubr.bf16.mxu0 %v8848
  %10363 = vmatmul.mubr.bf16.gmra.mxu0 %v8847
  %v10364 = vpop.f32.mrf.mxu0
  %v10365 = vadd.f32 %v10172, %v10364
  %v10366 = vpop.f32.mrf.mxu0
  %v10367 = vadd.f32 %v10174, %v10366
  %v10368 = vpop.f32.mrf.mxu0
  %v10369 = vadd.f32 %v10176, %v10368
  %v10370 = vpop.f32.mrf.mxu0
  %v10371 = vadd.f32 %v10178, %v10370
  %10372 = vmatprep.mubr.bf16.mxu0 %v8856
  %10373 = vmatmul.mubr.bf16.gmra.mxu0 %v8855
  %v10374 = vpop.f32.mrf.mxu0
  %v10375 = vadd.f32 %v10182, %v10374
  %v10376 = vpop.f32.mrf.mxu0
  %v10377 = vadd.f32 %v10184, %v10376
  %v10378 = vpop.f32.mrf.mxu0
  %v10379 = vadd.f32 %v10186, %v10378
  %v10380 = vpop.f32.mrf.mxu0
  %v10381 = vadd.f32 %v10188, %v10380
  %10382 = vmatprep.mubr.bf16.mxu0 %v8864
  %10383 = vmatmul.mubr.bf16.gmra.mxu0 %v8863
  %v10384 = vpop.f32.mrf.mxu0
  %v10385 = vadd.f32 %v10192, %v10384
  %v10386 = vpop.f32.mrf.mxu0
  %v10387 = vadd.f32 %v10194, %v10386
  %v10388 = vpop.f32.mrf.mxu0
  %v10389 = vadd.f32 %v10196, %v10388
  %v10390 = vpop.f32.mrf.mxu0
  %v10391 = vadd.f32 %v10198, %v10390
  %10392 = vmatprep.mubr.bf16.mxu0 %v8872
  %10393 = vmatmul.mubr.bf16.gmra.mxu0 %v8871
  %v10394 = vpop.f32.mrf.mxu0
  %v10395 = vadd.f32 %v10202, %v10394
  %v10396 = vpop.f32.mrf.mxu0
  %v10397 = vadd.f32 %v10204, %v10396
  %v10398 = vpop.f32.mrf.mxu0
  %v10399 = vadd.f32 %v10206, %v10398
  %v10400 = vpop.f32.mrf.mxu0
  %v10401 = vadd.f32 %v10208, %v10400
  %10402 = vmatprep.mubr.bf16.mxu0 %v8880
  %10403 = vmatmul.mubr.bf16.gmra.mxu0 %v8879
  %v10404 = vpop.f32.mrf.mxu0
  %v10405 = vadd.f32 %v10212, %v10404
  %v10406 = vpop.f32.mrf.mxu0
  %v10407 = vadd.f32 %v10214, %v10406
  %v10408 = vpop.f32.mrf.mxu0
  %v10409 = vadd.f32 %v10216, %v10408
  %v10410 = vpop.f32.mrf.mxu0
  %v10411 = vadd.f32 %v10218, %v10410
  %10412 = vmatprep.mubr.bf16.mxu0 %v8888
  %10413 = vmatmul.mubr.bf16.gmra.mxu0 %v8887
  %v10414 = vpop.f32.mrf.mxu0
  %v10415 = vadd.f32 %v10222, %v10414
  %v10416 = vpop.f32.mrf.mxu0
  %v10417 = vadd.f32 %v10224, %v10416
  %v10418 = vpop.f32.mrf.mxu0
  %v10419 = vadd.f32 %v10226, %v10418
  %v10420 = vpop.f32.mrf.mxu0
  %v10421 = vadd.f32 %v10228, %v10420
  %10422 = vmatprep.mubr.bf16.mxu0 %v8896
  %10423 = vmatmul.mubr.bf16.gmra.mxu0 %v8895
  %v10424 = vpop.f32.mrf.mxu0
  %v10425 = vadd.f32 %v10232, %v10424
  %v10426 = vpop.f32.mrf.mxu0
  %v10427 = vadd.f32 %v10234, %v10426
  %v10428 = vpop.f32.mrf.mxu0
  %v10429 = vadd.f32 %v10236, %v10428
  %v10430 = vpop.f32.mrf.mxu0
  %v10431 = vadd.f32 %v10238, %v10430
  %10432 = vmatprep.mubr.bf16.mxu0 %v8904
  %10433 = vmatmul.mubr.bf16.gmra.mxu0 %v8903
  %v10434 = vpop.f32.mrf.mxu0
  %v10435 = vadd.f32 %v10242, %v10434
  %v10436 = vpop.f32.mrf.mxu0
  %v10437 = vadd.f32 %v10244, %v10436
  %v10438 = vpop.f32.mrf.mxu0
  %v10439 = vadd.f32 %v10246, %v10438
  %v10440 = vpop.f32.mrf.mxu0
  %v10441 = vadd.f32 %v10248, %v10440
  %10442 = vmatprep.mubr.bf16.mxu0 %v8912
  %10443 = vmatmul.mubr.bf16.gmra.mxu0 %v8911
  %v10444 = vpop.f32.mrf.mxu0
  %v10445 = vadd.f32 %v10252, %v10444
  %v10446 = vpop.f32.mrf.mxu0
  %v10447 = vadd.f32 %v10254, %v10446
  %v10448 = vpop.f32.mrf.mxu0
  %v10449 = vadd.f32 %v10256, %v10448
  %v10450 = vpop.f32.mrf.mxu0
  %v10451 = vadd.f32 %v10258, %v10450
  %10452 = vmatprep.mubr.bf16.mxu0 %v8920
  %10453 = vmatmul.mubr.bf16.gmra.mxu0 %v8919
  %v10454 = vpop.f32.mrf.mxu0
  %v10455 = vadd.f32 %v10262, %v10454
  %v10456 = vpop.f32.mrf.mxu0
  %v10457 = vadd.f32 %v10264, %v10456
  %v10458 = vpop.f32.mrf.mxu0
  %v10459 = vadd.f32 %v10266, %v10458
  %v10460 = vpop.f32.mrf.mxu0
  %v10461 = vadd.f32 %v10268, %v10460
  %10462 = vmatprep.mubr.bf16.mxu0 %v8928
  %10463 = vmatmul.mubr.bf16.gmra.mxu0 %v8927
  %v10464 = vpop.f32.mrf.mxu0
  %v10465 = vadd.f32 %v10272, %v10464
  %v10466 = vpop.f32.mrf.mxu0
  %v10467 = vadd.f32 %v10274, %v10466
  %v10468 = vpop.f32.mrf.mxu0
  %v10469 = vadd.f32 %v10276, %v10468
  %v10470 = vpop.f32.mrf.mxu0
  %v10471 = vadd.f32 %v10278, %v10470
  %10472 = vdwg.mxu0
  %10473 = vmatprep.subr.bf16.mxu0 %v8407
  %10474 = vmatpush1.bf16.msra.mxu0 %v8406
  %10475 = vmatprep.subr.bf16.mxu0 %v8400
  %10476 = vmatpush1.bf16.msra.mxu0 %v8399
  %10477 = vmatprep.subr.bf16.mxu0 %v8393
  %10478 = vmatpush1.bf16.msra.mxu0 %v8392
  %10479 = vmatprep.subr.bf16.mxu0 %v8386
  %10480 = vmatpush1.bf16.msra.mxu0 %v8385
  %10481 = vmatprep.subr.bf16.mxu0 %v8379
  %10482 = vmatpush1.bf16.msra.mxu0 %v8378
  %10483 = vmatprep.subr.bf16.mxu0 %v8372
  %10484 = vmatpush1.bf16.msra.mxu0 %v8371
  %10485 = vmatprep.subr.bf16.mxu0 %v8365
  %10486 = vmatpush1.bf16.msra.mxu0 %v8364
  %10487 = vmatprep.subr.bf16.mxu0 %v8358
  %10488 = vmatpush1.bf16.msra.mxu0 %v8357
  %10489 = vmatprep.subr.bf16.mxu0 %v8463
  %10490 = vmatpush2.bf16.msra.mxu0 %v8462
  %10491 = vmatprep.subr.bf16.mxu0 %v8456
  %10492 = vmatpush2.bf16.msra.mxu0 %v8455
  %10493 = vmatprep.subr.bf16.mxu0 %v8449
  %10494 = vmatpush2.bf16.msra.mxu0 %v8448
  %10495 = vmatprep.subr.bf16.mxu0 %v8442
  %10496 = vmatpush2.bf16.msra.mxu0 %v8441
  %10497 = vmatprep.subr.bf16.mxu0 %v8435
  %10498 = vmatpush2.bf16.msra.mxu0 %v8434
  %10499 = vmatprep.subr.bf16.mxu0 %v8428
  %10500 = vmatpush2.bf16.msra.mxu0 %v8427
  %10501 = vmatprep.subr.bf16.mxu0 %v8421
  %10502 = vmatpush2.bf16.msra.mxu0 %v8420
  %10503 = vmatprep.subr.bf16.mxu0 %v8414
  %10504 = vmatpush2.bf16.msra.mxu0 %v8413
  %10505 = vmatprep.mubr.bf16.mxu0 %v8802
  %10506 = vmatmul.mubr.bf16.gmra.mxu0 %v8801
  %v10507 = vpop.f32.mrf.mxu0
  %v10508 = vadd.f32 0.0, %v10507
  %v10509 = vpop.f32.mrf.mxu0
  %v10510 = vadd.f32 0.0, %v10509
  %v10511 = vpop.f32.mrf.mxu0
  %v10512 = vadd.f32 0.0, %v10511
  %v10513 = vpop.f32.mrf.mxu0
  %v10514 = vadd.f32 0.0, %v10513
  %10515 = vmatprep.mubr.bf16.mxu0 %v8810
  %10516 = vmatmul.mubr.bf16.gmra.mxu0 %v8809
  %v10517 = vpop.f32.mrf.mxu0
  %v10518 = vadd.f32 0.0, %v10517
  %v10519 = vpop.f32.mrf.mxu0
  %v10520 = vadd.f32 0.0, %v10519
  %v10521 = vpop.f32.mrf.mxu0
  %v10522 = vadd.f32 0.0, %v10521
  %v10523 = vpop.f32.mrf.mxu0
  %v10524 = vadd.f32 0.0, %v10523
  %10525 = vmatprep.mubr.bf16.mxu0 %v8818
  %10526 = vmatmul.mubr.bf16.gmra.mxu0 %v8817
  %v10527 = vpop.f32.mrf.mxu0
  %v10528 = vadd.f32 0.0, %v10527
  %v10529 = vpop.f32.mrf.mxu0
  %v10530 = vadd.f32 0.0, %v10529
  %v10531 = vpop.f32.mrf.mxu0
  %v10532 = vadd.f32 0.0, %v10531
  %v10533 = vpop.f32.mrf.mxu0
  %v10534 = vadd.f32 0.0, %v10533
  %10535 = vmatprep.mubr.bf16.mxu0 %v8826
  %10536 = vmatmul.mubr.bf16.gmra.mxu0 %v8825
  %v10537 = vpop.f32.mrf.mxu0
  %v10538 = vadd.f32 0.0, %v10537
  %v10539 = vpop.f32.mrf.mxu0
  %v10540 = vadd.f32 0.0, %v10539
  %v10541 = vpop.f32.mrf.mxu0
  %v10542 = vadd.f32 0.0, %v10541
  %v10543 = vpop.f32.mrf.mxu0
  %v10544 = vadd.f32 0.0, %v10543
  %10545 = vmatprep.mubr.bf16.mxu0 %v8834
  %10546 = vmatmul.mubr.bf16.gmra.mxu0 %v8833
  %v10547 = vpop.f32.mrf.mxu0
  %v10548 = vadd.f32 0.0, %v10547
  %v10549 = vpop.f32.mrf.mxu0
  %v10550 = vadd.f32 0.0, %v10549
  %v10551 = vpop.f32.mrf.mxu0
  %v10552 = vadd.f32 0.0, %v10551
  %v10553 = vpop.f32.mrf.mxu0
  %v10554 = vadd.f32 0.0, %v10553
  %10555 = vmatprep.mubr.bf16.mxu0 %v8842
  %10556 = vmatmul.mubr.bf16.gmra.mxu0 %v8841
  %v10557 = vpop.f32.mrf.mxu0
  %v10558 = vadd.f32 0.0, %v10557
  %v10559 = vpop.f32.mrf.mxu0
  %v10560 = vadd.f32 0.0, %v10559
  %v10561 = vpop.f32.mrf.mxu0
  %v10562 = vadd.f32 0.0, %v10561
  %v10563 = vpop.f32.mrf.mxu0
  %v10564 = vadd.f32 0.0, %v10563
  %10565 = vmatprep.mubr.bf16.mxu0 %v8850
  %10566 = vmatmul.mubr.bf16.gmra.mxu0 %v8849
  %v10567 = vpop.f32.mrf.mxu0
  %v10568 = vadd.f32 0.0, %v10567
  %v10569 = vpop.f32.mrf.mxu0
  %v10570 = vadd.f32 0.0, %v10569
  %v10571 = vpop.f32.mrf.mxu0
  %v10572 = vadd.f32 0.0, %v10571
  %v10573 = vpop.f32.mrf.mxu0
  %v10574 = vadd.f32 0.0, %v10573
  %10575 = vmatprep.mubr.bf16.mxu0 %v8858
  %10576 = vmatmul.mubr.bf16.gmra.mxu0 %v8857
  %v10577 = vpop.f32.mrf.mxu0
  %v10578 = vadd.f32 0.0, %v10577
  %v10579 = vpop.f32.mrf.mxu0
  %v10580 = vadd.f32 0.0, %v10579
  %v10581 = vpop.f32.mrf.mxu0
  %v10582 = vadd.f32 0.0, %v10581
  %v10583 = vpop.f32.mrf.mxu0
  %v10584 = vadd.f32 0.0, %v10583
  %10585 = vmatprep.mubr.bf16.mxu0 %v8866
  %10586 = vmatmul.mubr.bf16.gmra.mxu0 %v8865
  %v10587 = vpop.f32.mrf.mxu0
  %v10588 = vadd.f32 0.0, %v10587
  %v10589 = vpop.f32.mrf.mxu0
  %v10590 = vadd.f32 0.0, %v10589
  %v10591 = vpop.f32.mrf.mxu0
  %v10592 = vadd.f32 0.0, %v10591
  %v10593 = vpop.f32.mrf.mxu0
  %v10594 = vadd.f32 0.0, %v10593
  %10595 = vmatprep.mubr.bf16.mxu0 %v8874
  %10596 = vmatmul.mubr.bf16.gmra.mxu0 %v8873
  %v10597 = vpop.f32.mrf.mxu0
  %v10598 = vadd.f32 0.0, %v10597
  %v10599 = vpop.f32.mrf.mxu0
  %v10600 = vadd.f32 0.0, %v10599
  %v10601 = vpop.f32.mrf.mxu0
  %v10602 = vadd.f32 0.0, %v10601
  %v10603 = vpop.f32.mrf.mxu0
  %v10604 = vadd.f32 0.0, %v10603
  %10605 = vmatprep.mubr.bf16.mxu0 %v8882
  %10606 = vmatmul.mubr.bf16.gmra.mxu0 %v8881
  %v10607 = vpop.f32.mrf.mxu0
  %v10608 = vadd.f32 0.0, %v10607
  %v10609 = vpop.f32.mrf.mxu0
  %v10610 = vadd.f32 0.0, %v10609
  %v10611 = vpop.f32.mrf.mxu0
  %v10612 = vadd.f32 0.0, %v10611
  %v10613 = vpop.f32.mrf.mxu0
  %v10614 = vadd.f32 0.0, %v10613
  %10615 = vmatprep.mubr.bf16.mxu0 %v8890
  %10616 = vmatmul.mubr.bf16.gmra.mxu0 %v8889
  %v10617 = vpop.f32.mrf.mxu0
  %v10618 = vadd.f32 0.0, %v10617
  %v10619 = vpop.f32.mrf.mxu0
  %v10620 = vadd.f32 0.0, %v10619
  %v10621 = vpop.f32.mrf.mxu0
  %v10622 = vadd.f32 0.0, %v10621
  %v10623 = vpop.f32.mrf.mxu0
  %v10624 = vadd.f32 0.0, %v10623
  %10625 = vmatprep.mubr.bf16.mxu0 %v8898
  %10626 = vmatmul.mubr.bf16.gmra.mxu0 %v8897
  %v10627 = vpop.f32.mrf.mxu0
  %v10628 = vadd.f32 0.0, %v10627
  %v10629 = vpop.f32.mrf.mxu0
  %v10630 = vadd.f32 0.0, %v10629
  %v10631 = vpop.f32.mrf.mxu0
  %v10632 = vadd.f32 0.0, %v10631
  %v10633 = vpop.f32.mrf.mxu0
  %v10634 = vadd.f32 0.0, %v10633
  %10635 = vmatprep.mubr.bf16.mxu0 %v8906
  %10636 = vmatmul.mubr.bf16.gmra.mxu0 %v8905
  %v10637 = vpop.f32.mrf.mxu0
  %v10638 = vadd.f32 0.0, %v10637
  %v10639 = vpop.f32.mrf.mxu0
  %v10640 = vadd.f32 0.0, %v10639
  %v10641 = vpop.f32.mrf.mxu0
  %v10642 = vadd.f32 0.0, %v10641
  %v10643 = vpop.f32.mrf.mxu0
  %v10644 = vadd.f32 0.0, %v10643
  %10645 = vmatprep.mubr.bf16.mxu0 %v8914
  %10646 = vmatmul.mubr.bf16.gmra.mxu0 %v8913
  %v10647 = vpop.f32.mrf.mxu0
  %v10648 = vadd.f32 0.0, %v10647
  %v10649 = vpop.f32.mrf.mxu0
  %v10650 = vadd.f32 0.0, %v10649
  %v10651 = vpop.f32.mrf.mxu0
  %v10652 = vadd.f32 0.0, %v10651
  %v10653 = vpop.f32.mrf.mxu0
  %v10654 = vadd.f32 0.0, %v10653
  %10655 = vmatprep.mubr.bf16.mxu0 %v8922
  %10656 = vmatmul.mubr.bf16.gmra.mxu0 %v8921
  %v10657 = vpop.f32.mrf.mxu0
  %v10658 = vadd.f32 0.0, %v10657
  %v10659 = vpop.f32.mrf.mxu0
  %v10660 = vadd.f32 0.0, %v10659
  %v10661 = vpop.f32.mrf.mxu0
  %v10662 = vadd.f32 0.0, %v10661
  %v10663 = vpop.f32.mrf.mxu0
  %v10664 = vadd.f32 0.0, %v10663
  %10665 = vdwg.mxu0
  %10666 = vmatprep.subr.bf16.mxu0 %v8519
  %10667 = vmatpush1.bf16.msra.mxu0 %v8518
  %10668 = vmatprep.subr.bf16.mxu0 %v8512
  %10669 = vmatpush1.bf16.msra.mxu0 %v8511
  %10670 = vmatprep.subr.bf16.mxu0 %v8505
  %10671 = vmatpush1.bf16.msra.mxu0 %v8504
  %10672 = vmatprep.subr.bf16.mxu0 %v8498
  %10673 = vmatpush1.bf16.msra.mxu0 %v8497
  %10674 = vmatprep.subr.bf16.mxu0 %v8491
  %10675 = vmatpush1.bf16.msra.mxu0 %v8490
  %10676 = vmatprep.subr.bf16.mxu0 %v8484
  %10677 = vmatpush1.bf16.msra.mxu0 %v8483
  %10678 = vmatprep.subr.bf16.mxu0 %v8477
  %10679 = vmatpush1.bf16.msra.mxu0 %v8476
  %10680 = vmatprep.subr.bf16.mxu0 %v8470
  %10681 = vmatpush1.bf16.msra.mxu0 %v8469
  %10682 = vmatprep.subr.bf16.mxu0 %v8575
  %10683 = vmatpush2.bf16.msra.mxu0 %v8574
  %10684 = vmatprep.subr.bf16.mxu0 %v8568
  %10685 = vmatpush2.bf16.msra.mxu0 %v8567
  %10686 = vmatprep.subr.bf16.mxu0 %v8561
  %10687 = vmatpush2.bf16.msra.mxu0 %v8560
  %10688 = vmatprep.subr.bf16.mxu0 %v8554
  %10689 = vmatpush2.bf16.msra.mxu0 %v8553
  %10690 = vmatprep.subr.bf16.mxu0 %v8547
  %10691 = vmatpush2.bf16.msra.mxu0 %v8546
  %10692 = vmatprep.subr.bf16.mxu0 %v8540
  %10693 = vmatpush2.bf16.msra.mxu0 %v8539
  %10694 = vmatprep.subr.bf16.mxu0 %v8533
  %10695 = vmatpush2.bf16.msra.mxu0 %v8532
  %10696 = vmatprep.subr.bf16.mxu0 %v8526
  %10697 = vmatpush2.bf16.msra.mxu0 %v8525
  %10698 = vmatprep.mubr.bf16.mxu0 %v8804
  %10699 = vmatmul.mubr.bf16.gmra.mxu0 %v8803
  %v10700 = vpop.f32.mrf.mxu0
  %v10701 = vadd.f32 %v10508, %v10700
  %v10702 = vpop.f32.mrf.mxu0
  %v10703 = vadd.f32 %v10510, %v10702
  %v10704 = vpop.f32.mrf.mxu0
  %v10705 = vadd.f32 %v10512, %v10704
  %v10706 = vpop.f32.mrf.mxu0
  %v10707 = vadd.f32 %v10514, %v10706
  %10708 = vmatprep.mubr.bf16.mxu0 %v8812
  %10709 = vmatmul.mubr.bf16.gmra.mxu0 %v8811
  %v10710 = vpop.f32.mrf.mxu0
  %v10711 = vadd.f32 %v10518, %v10710
  %v10712 = vpop.f32.mrf.mxu0
  %v10713 = vadd.f32 %v10520, %v10712
  %v10714 = vpop.f32.mrf.mxu0
  %v10715 = vadd.f32 %v10522, %v10714
  %v10716 = vpop.f32.mrf.mxu0
  %v10717 = vadd.f32 %v10524, %v10716
  %10718 = vmatprep.mubr.bf16.mxu0 %v8820
  %10719 = vmatmul.mubr.bf16.gmra.mxu0 %v8819
  %v10720 = vpop.f32.mrf.mxu0
  %v10721 = vadd.f32 %v10528, %v10720
  %v10722 = vpop.f32.mrf.mxu0
  %v10723 = vadd.f32 %v10530, %v10722
  %v10724 = vpop.f32.mrf.mxu0
  %v10725 = vadd.f32 %v10532, %v10724
  %v10726 = vpop.f32.mrf.mxu0
  %v10727 = vadd.f32 %v10534, %v10726
  %10728 = vmatprep.mubr.bf16.mxu0 %v8828
  %10729 = vmatmul.mubr.bf16.gmra.mxu0 %v8827
  %v10730 = vpop.f32.mrf.mxu0
  %v10731 = vadd.f32 %v10538, %v10730
  %v10732 = vpop.f32.mrf.mxu0
  %v10733 = vadd.f32 %v10540, %v10732
  %v10734 = vpop.f32.mrf.mxu0
  %v10735 = vadd.f32 %v10542, %v10734
  %v10736 = vpop.f32.mrf.mxu0
  %v10737 = vadd.f32 %v10544, %v10736
  %10738 = vmatprep.mubr.bf16.mxu0 %v8836
  %10739 = vmatmul.mubr.bf16.gmra.mxu0 %v8835
  %v10740 = vpop.f32.mrf.mxu0
  %v10741 = vadd.f32 %v10548, %v10740
  %v10742 = vpop.f32.mrf.mxu0
  %v10743 = vadd.f32 %v10550, %v10742
  %v10744 = vpop.f32.mrf.mxu0
  %v10745 = vadd.f32 %v10552, %v10744
  %v10746 = vpop.f32.mrf.mxu0
  %v10747 = vadd.f32 %v10554, %v10746
  %10748 = vmatprep.mubr.bf16.mxu0 %v8844
  %10749 = vmatmul.mubr.bf16.gmra.mxu0 %v8843
  %v10750 = vpop.f32.mrf.mxu0
  %v10751 = vadd.f32 %v10558, %v10750
  %v10752 = vpop.f32.mrf.mxu0
  %v10753 = vadd.f32 %v10560, %v10752
  %v10754 = vpop.f32.mrf.mxu0
  %v10755 = vadd.f32 %v10562, %v10754
  %v10756 = vpop.f32.mrf.mxu0
  %v10757 = vadd.f32 %v10564, %v10756
  %10758 = vmatprep.mubr.bf16.mxu0 %v8852
  %10759 = vmatmul.mubr.bf16.gmra.mxu0 %v8851
  %v10760 = vpop.f32.mrf.mxu0
  %v10761 = vadd.f32 %v10568, %v10760
  %v10762 = vpop.f32.mrf.mxu0
  %v10763 = vadd.f32 %v10570, %v10762
  %v10764 = vpop.f32.mrf.mxu0
  %v10765 = vadd.f32 %v10572, %v10764
  %v10766 = vpop.f32.mrf.mxu0
  %v10767 = vadd.f32 %v10574, %v10766
  %10768 = vmatprep.mubr.bf16.mxu0 %v8860
  %10769 = vmatmul.mubr.bf16.gmra.mxu0 %v8859
  %v10770 = vpop.f32.mrf.mxu0
  %v10771 = vadd.f32 %v10578, %v10770
  %v10772 = vpop.f32.mrf.mxu0
  %v10773 = vadd.f32 %v10580, %v10772
  %v10774 = vpop.f32.mrf.mxu0
  %v10775 = vadd.f32 %v10582, %v10774
  %v10776 = vpop.f32.mrf.mxu0
  %v10777 = vadd.f32 %v10584, %v10776
  %10778 = vmatprep.mubr.bf16.mxu0 %v8868
  %10779 = vmatmul.mubr.bf16.gmra.mxu0 %v8867
  %v10780 = vpop.f32.mrf.mxu0
  %v10781 = vadd.f32 %v10588, %v10780
  %v10782 = vpop.f32.mrf.mxu0
  %v10783 = vadd.f32 %v10590, %v10782
  %v10784 = vpop.f32.mrf.mxu0
  %v10785 = vadd.f32 %v10592, %v10784
  %v10786 = vpop.f32.mrf.mxu0
  %v10787 = vadd.f32 %v10594, %v10786
  %10788 = vmatprep.mubr.bf16.mxu0 %v8876
  %10789 = vmatmul.mubr.bf16.gmra.mxu0 %v8875
  %v10790 = vpop.f32.mrf.mxu0
  %v10791 = vadd.f32 %v10598, %v10790
  %v10792 = vpop.f32.mrf.mxu0
  %v10793 = vadd.f32 %v10600, %v10792
  %v10794 = vpop.f32.mrf.mxu0
  %v10795 = vadd.f32 %v10602, %v10794
  %v10796 = vpop.f32.mrf.mxu0
  %v10797 = vadd.f32 %v10604, %v10796
  %10798 = vmatprep.mubr.bf16.mxu0 %v8884
  %10799 = vmatmul.mubr.bf16.gmra.mxu0 %v8883
  %v10800 = vpop.f32.mrf.mxu0
  %v10801 = vadd.f32 %v10608, %v10800
  %v10802 = vpop.f32.mrf.mxu0
  %v10803 = vadd.f32 %v10610, %v10802
  %v10804 = vpop.f32.mrf.mxu0
  %v10805 = vadd.f32 %v10612, %v10804
  %v10806 = vpop.f32.mrf.mxu0
  %v10807 = vadd.f32 %v10614, %v10806
  %10808 = vmatprep.mubr.bf16.mxu0 %v8892
  %10809 = vmatmul.mubr.bf16.gmra.mxu0 %v8891
  %v10810 = vpop.f32.mrf.mxu0
  %v10811 = vadd.f32 %v10618, %v10810
  %v10812 = vpop.f32.mrf.mxu0
  %v10813 = vadd.f32 %v10620, %v10812
  %v10814 = vpop.f32.mrf.mxu0
  %v10815 = vadd.f32 %v10622, %v10814
  %v10816 = vpop.f32.mrf.mxu0
  %v10817 = vadd.f32 %v10624, %v10816
  %10818 = vmatprep.mubr.bf16.mxu0 %v8900
  %10819 = vmatmul.mubr.bf16.gmra.mxu0 %v8899
  %v10820 = vpop.f32.mrf.mxu0
  %v10821 = vadd.f32 %v10628, %v10820
  %v10822 = vpop.f32.mrf.mxu0
  %v10823 = vadd.f32 %v10630, %v10822
  %v10824 = vpop.f32.mrf.mxu0
  %v10825 = vadd.f32 %v10632, %v10824
  %v10826 = vpop.f32.mrf.mxu0
  %v10827 = vadd.f32 %v10634, %v10826
  %10828 = vmatprep.mubr.bf16.mxu0 %v8908
  %10829 = vmatmul.mubr.bf16.gmra.mxu0 %v8907
  %v10830 = vpop.f32.mrf.mxu0
  %v10831 = vadd.f32 %v10638, %v10830
  %v10832 = vpop.f32.mrf.mxu0
  %v10833 = vadd.f32 %v10640, %v10832
  %v10834 = vpop.f32.mrf.mxu0
  %v10835 = vadd.f32 %v10642, %v10834
  %v10836 = vpop.f32.mrf.mxu0
  %v10837 = vadd.f32 %v10644, %v10836
  %10838 = vmatprep.mubr.bf16.mxu0 %v8916
  %10839 = vmatmul.mubr.bf16.gmra.mxu0 %v8915
  %v10840 = vpop.f32.mrf.mxu0
  %v10841 = vadd.f32 %v10648, %v10840
  %v10842 = vpop.f32.mrf.mxu0
  %v10843 = vadd.f32 %v10650, %v10842
  %v10844 = vpop.f32.mrf.mxu0
  %v10845 = vadd.f32 %v10652, %v10844
  %v10846 = vpop.f32.mrf.mxu0
  %v10847 = vadd.f32 %v10654, %v10846
  %10848 = vmatprep.mubr.bf16.mxu0 %v8924
  %10849 = vmatmul.mubr.bf16.gmra.mxu0 %v8923
  %v10850 = vpop.f32.mrf.mxu0
  %v10851 = vadd.f32 %v10658, %v10850
  %v10852 = vpop.f32.mrf.mxu0
  %v10853 = vadd.f32 %v10660, %v10852
  %v10854 = vpop.f32.mrf.mxu0
  %v10855 = vadd.f32 %v10662, %v10854
  %v10856 = vpop.f32.mrf.mxu0
  %v10857 = vadd.f32 %v10664, %v10856
  %10858 = vdwg.mxu0
  %10859 = vmatprep.subr.bf16.mxu0 %v8631
  %10860 = vmatpush1.bf16.msra.mxu0 %v8630
  %10861 = vmatprep.subr.bf16.mxu0 %v8624
  %10862 = vmatpush1.bf16.msra.mxu0 %v8623
  %10863 = vmatprep.subr.bf16.mxu0 %v8617
  %10864 = vmatpush1.bf16.msra.mxu0 %v8616
  %10865 = vmatprep.subr.bf16.mxu0 %v8610
  %10866 = vmatpush1.bf16.msra.mxu0 %v8609
  %10867 = vmatprep.subr.bf16.mxu0 %v8603
  %10868 = vmatpush1.bf16.msra.mxu0 %v8602
  %10869 = vmatprep.subr.bf16.mxu0 %v8596
  %10870 = vmatpush1.bf16.msra.mxu0 %v8595
  %10871 = vmatprep.subr.bf16.mxu0 %v8589
  %10872 = vmatpush1.bf16.msra.mxu0 %v8588
  %10873 = vmatprep.subr.bf16.mxu0 %v8582
  %10874 = vmatpush1.bf16.msra.mxu0 %v8581
  %10875 = vmatprep.subr.bf16.mxu0 %v8687
  %10876 = vmatpush2.bf16.msra.mxu0 %v8686
  %10877 = vmatprep.subr.bf16.mxu0 %v8680
  %10878 = vmatpush2.bf16.msra.mxu0 %v8679
  %10879 = vmatprep.subr.bf16.mxu0 %v8673
  %10880 = vmatpush2.bf16.msra.mxu0 %v8672
  %10881 = vmatprep.subr.bf16.mxu0 %v8666
  %10882 = vmatpush2.bf16.msra.mxu0 %v8665
  %10883 = vmatprep.subr.bf16.mxu0 %v8659
  %10884 = vmatpush2.bf16.msra.mxu0 %v8658
  %10885 = vmatprep.subr.bf16.mxu0 %v8652
  %10886 = vmatpush2.bf16.msra.mxu0 %v8651
  %10887 = vmatprep.subr.bf16.mxu0 %v8645
  %10888 = vmatpush2.bf16.msra.mxu0 %v8644
  %10889 = vmatprep.subr.bf16.mxu0 %v8638
  %10890 = vmatpush2.bf16.msra.mxu0 %v8637
  %10891 = vmatprep.mubr.bf16.mxu0 %v8806
  %10892 = vmatmul.mubr.bf16.gmra.mxu0 %v8805
  %v10893 = vpop.f32.mrf.mxu0
  %v10894 = vadd.f32 %v10701, %v10893
  %v10895 = vpop.f32.mrf.mxu0
  %v10896 = vadd.f32 %v10703, %v10895
  %v10897 = vpop.f32.mrf.mxu0
  %v10898 = vadd.f32 %v10705, %v10897
  %v10899 = vpop.f32.mrf.mxu0
  %v10900 = vadd.f32 %v10707, %v10899
  %10901 = vmatprep.mubr.bf16.mxu0 %v8814
  %10902 = vmatmul.mubr.bf16.gmra.mxu0 %v8813
  %v10903 = vpop.f32.mrf.mxu0
  %v10904 = vadd.f32 %v10711, %v10903
  %v10905 = vpop.f32.mrf.mxu0
  %v10906 = vadd.f32 %v10713, %v10905
  %v10907 = vpop.f32.mrf.mxu0
  %v10908 = vadd.f32 %v10715, %v10907
  %v10909 = vpop.f32.mrf.mxu0
  %v10910 = vadd.f32 %v10717, %v10909
  %10911 = vmatprep.mubr.bf16.mxu0 %v8822
  %10912 = vmatmul.mubr.bf16.gmra.mxu0 %v8821
  %v10913 = vpop.f32.mrf.mxu0
  %v10914 = vadd.f32 %v10721, %v10913
  %v10915 = vpop.f32.mrf.mxu0
  %v10916 = vadd.f32 %v10723, %v10915
  %v10917 = vpop.f32.mrf.mxu0
  %v10918 = vadd.f32 %v10725, %v10917
  %v10919 = vpop.f32.mrf.mxu0
  %v10920 = vadd.f32 %v10727, %v10919
  %10921 = vmatprep.mubr.bf16.mxu0 %v8830
  %10922 = vmatmul.mubr.bf16.gmra.mxu0 %v8829
  %v10923 = vpop.f32.mrf.mxu0
  %v10924 = vadd.f32 %v10731, %v10923
  %v10925 = vpop.f32.mrf.mxu0
  %v10926 = vadd.f32 %v10733, %v10925
  %v10927 = vpop.f32.mrf.mxu0
  %v10928 = vadd.f32 %v10735, %v10927
  %v10929 = vpop.f32.mrf.mxu0
  %v10930 = vadd.f32 %v10737, %v10929
  %10931 = vmatprep.mubr.bf16.mxu0 %v8838
  %10932 = vmatmul.mubr.bf16.gmra.mxu0 %v8837
  %v10933 = vpop.f32.mrf.mxu0
  %v10934 = vadd.f32 %v10741, %v10933
  %v10935 = vpop.f32.mrf.mxu0
  %v10936 = vadd.f32 %v10743, %v10935
  %v10937 = vpop.f32.mrf.mxu0
  %v10938 = vadd.f32 %v10745, %v10937
  %v10939 = vpop.f32.mrf.mxu0
  %v10940 = vadd.f32 %v10747, %v10939
  %10941 = vmatprep.mubr.bf16.mxu0 %v8846
  %10942 = vmatmul.mubr.bf16.gmra.mxu0 %v8845
  %v10943 = vpop.f32.mrf.mxu0
  %v10944 = vadd.f32 %v10751, %v10943
  %v10945 = vpop.f32.mrf.mxu0
  %v10946 = vadd.f32 %v10753, %v10945
  %v10947 = vpop.f32.mrf.mxu0
  %v10948 = vadd.f32 %v10755, %v10947
  %v10949 = vpop.f32.mrf.mxu0
  %v10950 = vadd.f32 %v10757, %v10949
  %10951 = vmatprep.mubr.bf16.mxu0 %v8854
  %10952 = vmatmul.mubr.bf16.gmra.mxu0 %v8853
  %v10953 = vpop.f32.mrf.mxu0
  %v10954 = vadd.f32 %v10761, %v10953
  %v10955 = vpop.f32.mrf.mxu0
  %v10956 = vadd.f32 %v10763, %v10955
  %v10957 = vpop.f32.mrf.mxu0
  %v10958 = vadd.f32 %v10765, %v10957
  %v10959 = vpop.f32.mrf.mxu0
  %v10960 = vadd.f32 %v10767, %v10959
  %10961 = vmatprep.mubr.bf16.mxu0 %v8862
  %10962 = vmatmul.mubr.bf16.gmra.mxu0 %v8861
  %v10963 = vpop.f32.mrf.mxu0
  %v10964 = vadd.f32 %v10771, %v10963
  %v10965 = vpop.f32.mrf.mxu0
  %v10966 = vadd.f32 %v10773, %v10965
  %v10967 = vpop.f32.mrf.mxu0
  %v10968 = vadd.f32 %v10775, %v10967
  %v10969 = vpop.f32.mrf.mxu0
  %v10970 = vadd.f32 %v10777, %v10969
  %10971 = vmatprep.mubr.bf16.mxu0 %v8870
  %10972 = vmatmul.mubr.bf16.gmra.mxu0 %v8869
  %v10973 = vpop.f32.mrf.mxu0
  %v10974 = vadd.f32 %v10781, %v10973
  %v10975 = vpop.f32.mrf.mxu0
  %v10976 = vadd.f32 %v10783, %v10975
  %v10977 = vpop.f32.mrf.mxu0
  %v10978 = vadd.f32 %v10785, %v10977
  %v10979 = vpop.f32.mrf.mxu0
  %v10980 = vadd.f32 %v10787, %v10979
  %10981 = vmatprep.mubr.bf16.mxu0 %v8878
  %10982 = vmatmul.mubr.bf16.gmra.mxu0 %v8877
  %v10983 = vpop.f32.mrf.mxu0
  %v10984 = vadd.f32 %v10791, %v10983
  %v10985 = vpop.f32.mrf.mxu0
  %v10986 = vadd.f32 %v10793, %v10985
  %v10987 = vpop.f32.mrf.mxu0
  %v10988 = vadd.f32 %v10795, %v10987
  %v10989 = vpop.f32.mrf.mxu0
  %v10990 = vadd.f32 %v10797, %v10989
  %10991 = vmatprep.mubr.bf16.mxu0 %v8886
  %10992 = vmatmul.mubr.bf16.gmra.mxu0 %v8885
  %v10993 = vpop.f32.mrf.mxu0
  %v10994 = vadd.f32 %v10801, %v10993
  %v10995 = vpop.f32.mrf.mxu0
  %v10996 = vadd.f32 %v10803, %v10995
  %v10997 = vpop.f32.mrf.mxu0
  %v10998 = vadd.f32 %v10805, %v10997
  %v10999 = vpop.f32.mrf.mxu0
  %v11000 = vadd.f32 %v10807, %v10999
  %11001 = vmatprep.mubr.bf16.mxu0 %v8894
  %11002 = vmatmul.mubr.bf16.gmra.mxu0 %v8893
  %v11003 = vpop.f32.mrf.mxu0
  %v11004 = vadd.f32 %v10811, %v11003
  %v11005 = vpop.f32.mrf.mxu0
  %v11006 = vadd.f32 %v10813, %v11005
  %v11007 = vpop.f32.mrf.mxu0
  %v11008 = vadd.f32 %v10815, %v11007
  %v11009 = vpop.f32.mrf.mxu0
  %v11010 = vadd.f32 %v10817, %v11009
  %11011 = vmatprep.mubr.bf16.mxu0 %v8902
  %11012 = vmatmul.mubr.bf16.gmra.mxu0 %v8901
  %v11013 = vpop.f32.mrf.mxu0
  %v11014 = vadd.f32 %v10821, %v11013
  %v11015 = vpop.f32.mrf.mxu0
  %v11016 = vadd.f32 %v10823, %v11015
  %v11017 = vpop.f32.mrf.mxu0
  %v11018 = vadd.f32 %v10825, %v11017
  %v11019 = vpop.f32.mrf.mxu0
  %v11020 = vadd.f32 %v10827, %v11019
  %11021 = vmatprep.mubr.bf16.mxu0 %v8910
  %11022 = vmatmul.mubr.bf16.gmra.mxu0 %v8909
  %v11023 = vpop.f32.mrf.mxu0
  %v11024 = vadd.f32 %v10831, %v11023
  %v11025 = vpop.f32.mrf.mxu0
  %v11026 = vadd.f32 %v10833, %v11025
  %v11027 = vpop.f32.mrf.mxu0
  %v11028 = vadd.f32 %v10835, %v11027
  %v11029 = vpop.f32.mrf.mxu0
  %v11030 = vadd.f32 %v10837, %v11029
  %11031 = vmatprep.mubr.bf16.mxu0 %v8918
  %11032 = vmatmul.mubr.bf16.gmra.mxu0 %v8917
  %v11033 = vpop.f32.mrf.mxu0
  %v11034 = vadd.f32 %v10841, %v11033
  %v11035 = vpop.f32.mrf.mxu0
  %v11036 = vadd.f32 %v10843, %v11035
  %v11037 = vpop.f32.mrf.mxu0
  %v11038 = vadd.f32 %v10845, %v11037
  %v11039 = vpop.f32.mrf.mxu0
  %v11040 = vadd.f32 %v10847, %v11039
  %11041 = vmatprep.mubr.bf16.mxu0 %v8926
  %11042 = vmatmul.mubr.bf16.gmra.mxu0 %v8925
  %v11043 = vpop.f32.mrf.mxu0
  %v11044 = vadd.f32 %v10851, %v11043
  %v11045 = vpop.f32.mrf.mxu0
  %v11046 = vadd.f32 %v10853, %v11045
  %v11047 = vpop.f32.mrf.mxu0
  %v11048 = vadd.f32 %v10855, %v11047
  %v11049 = vpop.f32.mrf.mxu0
  %v11050 = vadd.f32 %v10857, %v11049
  %11051 = vdwg.mxu0
  %11052 = vmatprep.subr.bf16.mxu0 %v8743
  %11053 = vmatpush1.bf16.msra.mxu0 %v8742
  %11054 = vmatprep.subr.bf16.mxu0 %v8736
  %11055 = vmatpush1.bf16.msra.mxu0 %v8735
  %11056 = vmatprep.subr.bf16.mxu0 %v8729
  %11057 = vmatpush1.bf16.msra.mxu0 %v8728
  %11058 = vmatprep.subr.bf16.mxu0 %v8722
  %11059 = vmatpush1.bf16.msra.mxu0 %v8721
  %11060 = vmatprep.subr.bf16.mxu0 %v8715
  %11061 = vmatpush1.bf16.msra.mxu0 %v8714
  %11062 = vmatprep.subr.bf16.mxu0 %v8708
  %11063 = vmatpush1.bf16.msra.mxu0 %v8707
  %11064 = vmatprep.subr.bf16.mxu0 %v8701
  %11065 = vmatpush1.bf16.msra.mxu0 %v8700
  %11066 = vmatprep.subr.bf16.mxu0 %v8694
  %11067 = vmatpush1.bf16.msra.mxu0 %v8693
  %11068 = vmatprep.subr.bf16.mxu0 %v8799
  %11069 = vmatpush2.bf16.msra.mxu0 %v8798
  %11070 = vmatprep.subr.bf16.mxu0 %v8792
  %11071 = vmatpush2.bf16.msra.mxu0 %v8791
  %11072 = vmatprep.subr.bf16.mxu0 %v8785
  %11073 = vmatpush2.bf16.msra.mxu0 %v8784
  %11074 = vmatprep.subr.bf16.mxu0 %v8778
  %11075 = vmatpush2.bf16.msra.mxu0 %v8777
  %11076 = vmatprep.subr.bf16.mxu0 %v8771
  %11077 = vmatpush2.bf16.msra.mxu0 %v8770
  %11078 = vmatprep.subr.bf16.mxu0 %v8764
  %11079 = vmatpush2.bf16.msra.mxu0 %v8763
  %11080 = vmatprep.subr.bf16.mxu0 %v8757
  %11081 = vmatpush2.bf16.msra.mxu0 %v8756
  %11082 = vmatprep.subr.bf16.mxu0 %v8750
  %11083 = vmatpush2.bf16.msra.mxu0 %v8749
  %11084 = vmatprep.mubr.bf16.mxu0 %v8808
  %11085 = vmatmul.mubr.bf16.gmra.mxu0 %v8807
  %v11086 = vpop.f32.mrf.mxu0
  %v11087 = vadd.f32 %v10894, %v11086
  %v11088 = vpop.f32.mrf.mxu0
  %v11089 = vadd.f32 %v10896, %v11088
  %v11090 = vpop.f32.mrf.mxu0
  %v11091 = vadd.f32 %v10898, %v11090
  %v11092 = vpop.f32.mrf.mxu0
  %v11093 = vadd.f32 %v10900, %v11092
  %11094 = vmatprep.mubr.bf16.mxu0 %v8816
  %11095 = vmatmul.mubr.bf16.gmra.mxu0 %v8815
  %v11096 = vpop.f32.mrf.mxu0
  %v11097 = vadd.f32 %v10904, %v11096
  %v11098 = vpop.f32.mrf.mxu0
  %v11099 = vadd.f32 %v10906, %v11098
  %v11100 = vpop.f32.mrf.mxu0
  %v11101 = vadd.f32 %v10908, %v11100
  %v11102 = vpop.f32.mrf.mxu0
  %v11103 = vadd.f32 %v10910, %v11102
  %11104 = vmatprep.mubr.bf16.mxu0 %v8824
  %11105 = vmatmul.mubr.bf16.gmra.mxu0 %v8823
  %v11106 = vpop.f32.mrf.mxu0
  %v11107 = vadd.f32 %v10914, %v11106
  %v11108 = vpop.f32.mrf.mxu0
  %v11109 = vadd.f32 %v10916, %v11108
  %v11110 = vpop.f32.mrf.mxu0
  %v11111 = vadd.f32 %v10918, %v11110
  %v11112 = vpop.f32.mrf.mxu0
  %v11113 = vadd.f32 %v10920, %v11112
  %11114 = vmatprep.mubr.bf16.mxu0 %v8832
  %11115 = vmatmul.mubr.bf16.gmra.mxu0 %v8831
  %v11116 = vpop.f32.mrf.mxu0
  %v11117 = vadd.f32 %v10924, %v11116
  %v11118 = vpop.f32.mrf.mxu0
  %v11119 = vadd.f32 %v10926, %v11118
  %v11120 = vpop.f32.mrf.mxu0
  %v11121 = vadd.f32 %v10928, %v11120
  %v11122 = vpop.f32.mrf.mxu0
  %v11123 = vadd.f32 %v10930, %v11122
  %11124 = vmatprep.mubr.bf16.mxu0 %v8840
  %11125 = vmatmul.mubr.bf16.gmra.mxu0 %v8839
  %v11126 = vpop.f32.mrf.mxu0
  %v11127 = vadd.f32 %v10934, %v11126
  %v11128 = vpop.f32.mrf.mxu0
  %v11129 = vadd.f32 %v10936, %v11128
  %v11130 = vpop.f32.mrf.mxu0
  %v11131 = vadd.f32 %v10938, %v11130
  %v11132 = vpop.f32.mrf.mxu0
  %v11133 = vadd.f32 %v10940, %v11132
  %11134 = vmatprep.mubr.bf16.mxu0 %v8848
  %11135 = vmatmul.mubr.bf16.gmra.mxu0 %v8847
  %v11136 = vpop.f32.mrf.mxu0
  %v11137 = vadd.f32 %v10944, %v11136
  %v11138 = vpop.f32.mrf.mxu0
  %v11139 = vadd.f32 %v10946, %v11138
  %v11140 = vpop.f32.mrf.mxu0
  %v11141 = vadd.f32 %v10948, %v11140
  %v11142 = vpop.f32.mrf.mxu0
  %v11143 = vadd.f32 %v10950, %v11142
  %11144 = vmatprep.mubr.bf16.mxu0 %v8856
  %11145 = vmatmul.mubr.bf16.gmra.mxu0 %v8855
  %v11146 = vpop.f32.mrf.mxu0
  %v11147 = vadd.f32 %v10954, %v11146
  %v11148 = vpop.f32.mrf.mxu0
  %v11149 = vadd.f32 %v10956, %v11148
  %v11150 = vpop.f32.mrf.mxu0
  %v11151 = vadd.f32 %v10958, %v11150
  %v11152 = vpop.f32.mrf.mxu0
  %v11153 = vadd.f32 %v10960, %v11152
  %11154 = vmatprep.mubr.bf16.mxu0 %v8864
  %11155 = vmatmul.mubr.bf16.gmra.mxu0 %v8863
  %v11156 = vpop.f32.mrf.mxu0
  %v11157 = vadd.f32 %v10964, %v11156
  %v11158 = vpop.f32.mrf.mxu0
  %v11159 = vadd.f32 %v10966, %v11158
  %v11160 = vpop.f32.mrf.mxu0
  %v11161 = vadd.f32 %v10968, %v11160
  %v11162 = vpop.f32.mrf.mxu0
  %v11163 = vadd.f32 %v10970, %v11162
  %11164 = vmatprep.mubr.bf16.mxu0 %v8872
  %11165 = vmatmul.mubr.bf16.gmra.mxu0 %v8871
  %v11166 = vpop.f32.mrf.mxu0
  %v11167 = vadd.f32 %v10974, %v11166
  %v11168 = vpop.f32.mrf.mxu0
  %v11169 = vadd.f32 %v10976, %v11168
  %v11170 = vpop.f32.mrf.mxu0
  %v11171 = vadd.f32 %v10978, %v11170
  %v11172 = vpop.f32.mrf.mxu0
  %v11173 = vadd.f32 %v10980, %v11172
  %11174 = vmatprep.mubr.bf16.mxu0 %v8880
  %11175 = vmatmul.mubr.bf16.gmra.mxu0 %v8879
  %v11176 = vpop.f32.mrf.mxu0
  %v11177 = vadd.f32 %v10984, %v11176
  %v11178 = vpop.f32.mrf.mxu0
  %v11179 = vadd.f32 %v10986, %v11178
  %v11180 = vpop.f32.mrf.mxu0
  %v11181 = vadd.f32 %v10988, %v11180
  %v11182 = vpop.f32.mrf.mxu0
  %v11183 = vadd.f32 %v10990, %v11182
  %11184 = vmatprep.mubr.bf16.mxu0 %v8888
  %11185 = vmatmul.mubr.bf16.gmra.mxu0 %v8887
  %v11186 = vpop.f32.mrf.mxu0
  %v11187 = vadd.f32 %v10994, %v11186
  %v11188 = vpop.f32.mrf.mxu0
  %v11189 = vadd.f32 %v10996, %v11188
  %v11190 = vpop.f32.mrf.mxu0
  %v11191 = vadd.f32 %v10998, %v11190
  %v11192 = vpop.f32.mrf.mxu0
  %v11193 = vadd.f32 %v11000, %v11192
  %11194 = vmatprep.mubr.bf16.mxu0 %v8896
  %11195 = vmatmul.mubr.bf16.gmra.mxu0 %v8895
  %v11196 = vpop.f32.mrf.mxu0
  %v11197 = vadd.f32 %v11004, %v11196
  %v11198 = vpop.f32.mrf.mxu0
  %v11199 = vadd.f32 %v11006, %v11198
  %v11200 = vpop.f32.mrf.mxu0
  %v11201 = vadd.f32 %v11008, %v11200
  %v11202 = vpop.f32.mrf.mxu0
  %v11203 = vadd.f32 %v11010, %v11202
  %11204 = vmatprep.mubr.bf16.mxu0 %v8904
  %11205 = vmatmul.mubr.bf16.gmra.mxu0 %v8903
  %v11206 = vpop.f32.mrf.mxu0
  %v11207 = vadd.f32 %v11014, %v11206
  %v11208 = vpop.f32.mrf.mxu0
  %v11209 = vadd.f32 %v11016, %v11208
  %v11210 = vpop.f32.mrf.mxu0
  %v11211 = vadd.f32 %v11018, %v11210
  %v11212 = vpop.f32.mrf.mxu0
  %v11213 = vadd.f32 %v11020, %v11212
  %11214 = vmatprep.mubr.bf16.mxu0 %v8912
  %11215 = vmatmul.mubr.bf16.gmra.mxu0 %v8911
  %v11216 = vpop.f32.mrf.mxu0
  %v11217 = vadd.f32 %v11024, %v11216
  %v11218 = vpop.f32.mrf.mxu0
  %v11219 = vadd.f32 %v11026, %v11218
  %v11220 = vpop.f32.mrf.mxu0
  %v11221 = vadd.f32 %v11028, %v11220
  %v11222 = vpop.f32.mrf.mxu0
  %v11223 = vadd.f32 %v11030, %v11222
  %11224 = vmatprep.mubr.bf16.mxu0 %v8920
  %11225 = vmatmul.mubr.bf16.gmra.mxu0 %v8919
  %v11226 = vpop.f32.mrf.mxu0
  %v11227 = vadd.f32 %v11034, %v11226
  %v11228 = vpop.f32.mrf.mxu0
  %v11229 = vadd.f32 %v11036, %v11228
  %v11230 = vpop.f32.mrf.mxu0
  %v11231 = vadd.f32 %v11038, %v11230
  %v11232 = vpop.f32.mrf.mxu0
  %v11233 = vadd.f32 %v11040, %v11232
  %11234 = vmatprep.mubr.bf16.mxu0 %v8928
  %11235 = vmatmul.mubr.bf16.gmra.mxu0 %v8927
  %v11236 = vpop.f32.mrf.mxu0
  %v11237 = vadd.f32 %v11044, %v11236
  %v11238 = vpop.f32.mrf.mxu0
  %v11239 = vadd.f32 %v11046, %v11238
  %v11240 = vpop.f32.mrf.mxu0
  %v11241 = vadd.f32 %v11048, %v11240
  %v11242 = vpop.f32.mrf.mxu0
  %v11243 = vadd.f32 %v11050, %v11242
  %11244 = vdwg.mxu0
  %11245 = vmatprep.subr.bf16.mxu0 0
  %11246 = vmatpush1.bf16.msra.mxu0 %v8408
  %11247 = vmatprep.subr.bf16.mxu0 0
  %11248 = vmatpush1.bf16.msra.mxu0 %v8401
  %11249 = vmatprep.subr.bf16.mxu0 0
  %11250 = vmatpush1.bf16.msra.mxu0 %v8394
  %11251 = vmatprep.subr.bf16.mxu0 0
  %11252 = vmatpush1.bf16.msra.mxu0 %v8387
  %11253 = vmatprep.subr.bf16.mxu0 0
  %11254 = vmatpush1.bf16.msra.mxu0 %v8380
  %11255 = vmatprep.subr.bf16.mxu0 0
  %11256 = vmatpush1.bf16.msra.mxu0 %v8373
  %11257 = vmatprep.subr.bf16.mxu0 0
  %11258 = vmatpush1.bf16.msra.mxu0 %v8366
  %11259 = vmatprep.subr.bf16.mxu0 0
  %11260 = vmatpush1.bf16.msra.mxu0 %v8359
  %11261 = vmatprep.subr.bf16.mxu0 0
  %11262 = vmatpush2.bf16.msra.mxu0 %v8464
  %11263 = vmatprep.subr.bf16.mxu0 0
  %11264 = vmatpush2.bf16.msra.mxu0 %v8457
  %11265 = vmatprep.subr.bf16.mxu0 0
  %11266 = vmatpush2.bf16.msra.mxu0 %v8450
  %11267 = vmatprep.subr.bf16.mxu0 0
  %11268 = vmatpush2.bf16.msra.mxu0 %v8443
  %11269 = vmatprep.subr.bf16.mxu0 0
  %11270 = vmatpush2.bf16.msra.mxu0 %v8436
  %11271 = vmatprep.subr.bf16.mxu0 0
  %11272 = vmatpush2.bf16.msra.mxu0 %v8429
  %11273 = vmatprep.subr.bf16.mxu0 0
  %11274 = vmatpush2.bf16.msra.mxu0 %v8422
  %11275 = vmatprep.subr.bf16.mxu0 0
  %11276 = vmatpush2.bf16.msra.mxu0 %v8415
  %11277 = vmatprep.mubr.bf16.mxu0 %v8802
  %11278 = vmatmul.mubr.bf16.gmra.mxu0 %v8801
  %v11279 = vpop.f32.mrf.mxu0
  %v11280 = vadd.f32 0.0, %v11279
  %v11281 = vpop.f32.mrf.mxu0
  %v11282 = vpop.f32.mrf.mxu0
  %v11283 = vadd.f32 0.0, %v11282
  %v11284 = vpop.f32.mrf.mxu0
  %11285 = vmatprep.mubr.bf16.mxu0 %v8810
  %11286 = vmatmul.mubr.bf16.gmra.mxu0 %v8809
  %v11287 = vpop.f32.mrf.mxu0
  %v11288 = vadd.f32 0.0, %v11287
  %v11289 = vpop.f32.mrf.mxu0
  %v11290 = vpop.f32.mrf.mxu0
  %v11291 = vadd.f32 0.0, %v11290
  %v11292 = vpop.f32.mrf.mxu0
  %11293 = vmatprep.mubr.bf16.mxu0 %v8818
  %11294 = vmatmul.mubr.bf16.gmra.mxu0 %v8817
  %v11295 = vpop.f32.mrf.mxu0
  %v11296 = vadd.f32 0.0, %v11295
  %v11297 = vpop.f32.mrf.mxu0
  %v11298 = vpop.f32.mrf.mxu0
  %v11299 = vadd.f32 0.0, %v11298
  %v11300 = vpop.f32.mrf.mxu0
  %11301 = vmatprep.mubr.bf16.mxu0 %v8826
  %11302 = vmatmul.mubr.bf16.gmra.mxu0 %v8825
  %v11303 = vpop.f32.mrf.mxu0
  %v11304 = vadd.f32 0.0, %v11303
  %v11305 = vpop.f32.mrf.mxu0
  %v11306 = vpop.f32.mrf.mxu0
  %v11307 = vadd.f32 0.0, %v11306
  %v11308 = vpop.f32.mrf.mxu0
  %11309 = vmatprep.mubr.bf16.mxu0 %v8834
  %11310 = vmatmul.mubr.bf16.gmra.mxu0 %v8833
  %v11311 = vpop.f32.mrf.mxu0
  %v11312 = vadd.f32 0.0, %v11311
  %v11313 = vpop.f32.mrf.mxu0
  %v11314 = vpop.f32.mrf.mxu0
  %v11315 = vadd.f32 0.0, %v11314
  %v11316 = vpop.f32.mrf.mxu0
  %11317 = vmatprep.mubr.bf16.mxu0 %v8842
  %11318 = vmatmul.mubr.bf16.gmra.mxu0 %v8841
  %v11319 = vpop.f32.mrf.mxu0
  %v11320 = vadd.f32 0.0, %v11319
  %v11321 = vpop.f32.mrf.mxu0
  %v11322 = vpop.f32.mrf.mxu0
  %v11323 = vadd.f32 0.0, %v11322
  %v11324 = vpop.f32.mrf.mxu0
  %11325 = vmatprep.mubr.bf16.mxu0 %v8850
  %11326 = vmatmul.mubr.bf16.gmra.mxu0 %v8849
  %v11327 = vpop.f32.mrf.mxu0
  %v11328 = vadd.f32 0.0, %v11327
  %v11329 = vpop.f32.mrf.mxu0
  %v11330 = vpop.f32.mrf.mxu0
  %v11331 = vadd.f32 0.0, %v11330
  %v11332 = vpop.f32.mrf.mxu0
  %11333 = vmatprep.mubr.bf16.mxu0 %v8858
  %11334 = vmatmul.mubr.bf16.gmra.mxu0 %v8857
  %v11335 = vpop.f32.mrf.mxu0
  %v11336 = vadd.f32 0.0, %v11335
  %v11337 = vpop.f32.mrf.mxu0
  %v11338 = vpop.f32.mrf.mxu0
  %v11339 = vadd.f32 0.0, %v11338
  %v11340 = vpop.f32.mrf.mxu0
  %11341 = vmatprep.mubr.bf16.mxu0 %v8866
  %11342 = vmatmul.mubr.bf16.gmra.mxu0 %v8865
  %v11343 = vpop.f32.mrf.mxu0
  %v11344 = vadd.f32 0.0, %v11343
  %v11345 = vpop.f32.mrf.mxu0
  %v11346 = vpop.f32.mrf.mxu0
  %v11347 = vadd.f32 0.0, %v11346
  %v11348 = vpop.f32.mrf.mxu0
  %11349 = vmatprep.mubr.bf16.mxu0 %v8874
  %11350 = vmatmul.mubr.bf16.gmra.mxu0 %v8873
  %v11351 = vpop.f32.mrf.mxu0
  %v11352 = vadd.f32 0.0, %v11351
  %v11353 = vpop.f32.mrf.mxu0
  %v11354 = vpop.f32.mrf.mxu0
  %v11355 = vadd.f32 0.0, %v11354
  %v11356 = vpop.f32.mrf.mxu0
  %11357 = vmatprep.mubr.bf16.mxu0 %v8882
  %11358 = vmatmul.mubr.bf16.gmra.mxu0 %v8881
  %v11359 = vpop.f32.mrf.mxu0
  %v11360 = vadd.f32 0.0, %v11359
  %v11361 = vpop.f32.mrf.mxu0
  %v11362 = vpop.f32.mrf.mxu0
  %v11363 = vadd.f32 0.0, %v11362
  %v11364 = vpop.f32.mrf.mxu0
  %11365 = vmatprep.mubr.bf16.mxu0 %v8890
  %11366 = vmatmul.mubr.bf16.gmra.mxu0 %v8889
  %v11367 = vpop.f32.mrf.mxu0
  %v11368 = vadd.f32 0.0, %v11367
  %v11369 = vpop.f32.mrf.mxu0
  %v11370 = vpop.f32.mrf.mxu0
  %v11371 = vadd.f32 0.0, %v11370
  %v11372 = vpop.f32.mrf.mxu0
  %11373 = vmatprep.mubr.bf16.mxu0 %v8898
  %11374 = vmatmul.mubr.bf16.gmra.mxu0 %v8897
  %v11375 = vpop.f32.mrf.mxu0
  %v11376 = vadd.f32 0.0, %v11375
  %v11377 = vpop.f32.mrf.mxu0
  %v11378 = vpop.f32.mrf.mxu0
  %v11379 = vadd.f32 0.0, %v11378
  %v11380 = vpop.f32.mrf.mxu0
  %11381 = vmatprep.mubr.bf16.mxu0 %v8906
  %11382 = vmatmul.mubr.bf16.gmra.mxu0 %v8905
  %v11383 = vpop.f32.mrf.mxu0
  %v11384 = vadd.f32 0.0, %v11383
  %v11385 = vpop.f32.mrf.mxu0
  %v11386 = vpop.f32.mrf.mxu0
  %v11387 = vadd.f32 0.0, %v11386
  %v11388 = vpop.f32.mrf.mxu0
  %11389 = vmatprep.mubr.bf16.mxu0 %v8914
  %11390 = vmatmul.mubr.bf16.gmra.mxu0 %v8913
  %v11391 = vpop.f32.mrf.mxu0
  %v11392 = vadd.f32 0.0, %v11391
  %v11393 = vpop.f32.mrf.mxu0
  %v11394 = vpop.f32.mrf.mxu0
  %v11395 = vadd.f32 0.0, %v11394
  %v11396 = vpop.f32.mrf.mxu0
  %11397 = vmatprep.mubr.bf16.mxu0 %v8922
  %11398 = vmatmul.mubr.bf16.gmra.mxu0 %v8921
  %v11399 = vpop.f32.mrf.mxu0
  %v11400 = vadd.f32 0.0, %v11399
  %v11401 = vpop.f32.mrf.mxu0
  %v11402 = vpop.f32.mrf.mxu0
  %v11403 = vadd.f32 0.0, %v11402
  %v11404 = vpop.f32.mrf.mxu0
  %11405 = vdwg.mxu0
  %11406 = vmatprep.subr.bf16.mxu0 0
  %11407 = vmatpush1.bf16.msra.mxu0 %v8520
  %11408 = vmatprep.subr.bf16.mxu0 0
  %11409 = vmatpush1.bf16.msra.mxu0 %v8513
  %11410 = vmatprep.subr.bf16.mxu0 0
  %11411 = vmatpush1.bf16.msra.mxu0 %v8506
  %11412 = vmatprep.subr.bf16.mxu0 0
  %11413 = vmatpush1.bf16.msra.mxu0 %v8499
  %11414 = vmatprep.subr.bf16.mxu0 0
  %11415 = vmatpush1.bf16.msra.mxu0 %v8492
  %11416 = vmatprep.subr.bf16.mxu0 0
  %11417 = vmatpush1.bf16.msra.mxu0 %v8485
  %11418 = vmatprep.subr.bf16.mxu0 0
  %11419 = vmatpush1.bf16.msra.mxu0 %v8478
  %11420 = vmatprep.subr.bf16.mxu0 0
  %11421 = vmatpush1.bf16.msra.mxu0 %v8471
  %11422 = vmatprep.subr.bf16.mxu0 0
  %11423 = vmatpush2.bf16.msra.mxu0 %v8576
  %11424 = vmatprep.subr.bf16.mxu0 0
  %11425 = vmatpush2.bf16.msra.mxu0 %v8569
  %11426 = vmatprep.subr.bf16.mxu0 0
  %11427 = vmatpush2.bf16.msra.mxu0 %v8562
  %11428 = vmatprep.subr.bf16.mxu0 0
  %11429 = vmatpush2.bf16.msra.mxu0 %v8555
  %11430 = vmatprep.subr.bf16.mxu0 0
  %11431 = vmatpush2.bf16.msra.mxu0 %v8548
  %11432 = vmatprep.subr.bf16.mxu0 0
  %11433 = vmatpush2.bf16.msra.mxu0 %v8541
  %11434 = vmatprep.subr.bf16.mxu0 0
  %11435 = vmatpush2.bf16.msra.mxu0 %v8534
  %11436 = vmatprep.subr.bf16.mxu0 0
  %11437 = vmatpush2.bf16.msra.mxu0 %v8527
  %11438 = vmatprep.mubr.bf16.mxu0 %v8804
  %11439 = vmatmul.mubr.bf16.gmra.mxu0 %v8803
  %v11440 = vpop.f32.mrf.mxu0
  %v11441 = vadd.f32 %v11280, %v11440
  %v11442 = vpop.f32.mrf.mxu0
  %v11443 = vpop.f32.mrf.mxu0
  %v11444 = vadd.f32 %v11283, %v11443
  %v11445 = vpop.f32.mrf.mxu0
  %11446 = vmatprep.mubr.bf16.mxu0 %v8812
  %11447 = vmatmul.mubr.bf16.gmra.mxu0 %v8811
  %v11448 = vpop.f32.mrf.mxu0
  %v11449 = vadd.f32 %v11288, %v11448
  %v11450 = vpop.f32.mrf.mxu0
  %v11451 = vpop.f32.mrf.mxu0
  %v11452 = vadd.f32 %v11291, %v11451
  %v11453 = vpop.f32.mrf.mxu0
  %11454 = vmatprep.mubr.bf16.mxu0 %v8820
  %11455 = vmatmul.mubr.bf16.gmra.mxu0 %v8819
  %v11456 = vpop.f32.mrf.mxu0
  %v11457 = vadd.f32 %v11296, %v11456
  %v11458 = vpop.f32.mrf.mxu0
  %v11459 = vpop.f32.mrf.mxu0
  %v11460 = vadd.f32 %v11299, %v11459
  %v11461 = vpop.f32.mrf.mxu0
  %11462 = vmatprep.mubr.bf16.mxu0 %v8828
  %11463 = vmatmul.mubr.bf16.gmra.mxu0 %v8827
  %v11464 = vpop.f32.mrf.mxu0
  %v11465 = vadd.f32 %v11304, %v11464
  %v11466 = vpop.f32.mrf.mxu0
  %v11467 = vpop.f32.mrf.mxu0
  %v11468 = vadd.f32 %v11307, %v11467
  %v11469 = vpop.f32.mrf.mxu0
  %11470 = vmatprep.mubr.bf16.mxu0 %v8836
  %11471 = vmatmul.mubr.bf16.gmra.mxu0 %v8835
  %v11472 = vpop.f32.mrf.mxu0
  %v11473 = vadd.f32 %v11312, %v11472
  %v11474 = vpop.f32.mrf.mxu0
  %v11475 = vpop.f32.mrf.mxu0
  %v11476 = vadd.f32 %v11315, %v11475
  %v11477 = vpop.f32.mrf.mxu0
  %11478 = vmatprep.mubr.bf16.mxu0 %v8844
  %11479 = vmatmul.mubr.bf16.gmra.mxu0 %v8843
  %v11480 = vpop.f32.mrf.mxu0
  %v11481 = vadd.f32 %v11320, %v11480
  %v11482 = vpop.f32.mrf.mxu0
  %v11483 = vpop.f32.mrf.mxu0
  %v11484 = vadd.f32 %v11323, %v11483
  %v11485 = vpop.f32.mrf.mxu0
  %11486 = vmatprep.mubr.bf16.mxu0 %v8852
  %11487 = vmatmul.mubr.bf16.gmra.mxu0 %v8851
  %v11488 = vpop.f32.mrf.mxu0
  %v11489 = vadd.f32 %v11328, %v11488
  %v11490 = vpop.f32.mrf.mxu0
  %v11491 = vpop.f32.mrf.mxu0
  %v11492 = vadd.f32 %v11331, %v11491
  %v11493 = vpop.f32.mrf.mxu0
  %11494 = vmatprep.mubr.bf16.mxu0 %v8860
  %11495 = vmatmul.mubr.bf16.gmra.mxu0 %v8859
  %v11496 = vpop.f32.mrf.mxu0
  %v11497 = vadd.f32 %v11336, %v11496
  %v11498 = vpop.f32.mrf.mxu0
  %v11499 = vpop.f32.mrf.mxu0
  %v11500 = vadd.f32 %v11339, %v11499
  %v11501 = vpop.f32.mrf.mxu0
  %11502 = vmatprep.mubr.bf16.mxu0 %v8868
  %11503 = vmatmul.mubr.bf16.gmra.mxu0 %v8867
  %v11504 = vpop.f32.mrf.mxu0
  %v11505 = vadd.f32 %v11344, %v11504
  %v11506 = vpop.f32.mrf.mxu0
  %v11507 = vpop.f32.mrf.mxu0
  %v11508 = vadd.f32 %v11347, %v11507
  %v11509 = vpop.f32.mrf.mxu0
  %11510 = vmatprep.mubr.bf16.mxu0 %v8876
  %11511 = vmatmul.mubr.bf16.gmra.mxu0 %v8875
  %v11512 = vpop.f32.mrf.mxu0
  %v11513 = vadd.f32 %v11352, %v11512
  %v11514 = vpop.f32.mrf.mxu0
  %v11515 = vpop.f32.mrf.mxu0
  %v11516 = vadd.f32 %v11355, %v11515
  %v11517 = vpop.f32.mrf.mxu0
  %11518 = vmatprep.mubr.bf16.mxu0 %v8884
  %11519 = vmatmul.mubr.bf16.gmra.mxu0 %v8883
  %v11520 = vpop.f32.mrf.mxu0
  %v11521 = vadd.f32 %v11360, %v11520
  %v11522 = vpop.f32.mrf.mxu0
  %v11523 = vpop.f32.mrf.mxu0
  %v11524 = vadd.f32 %v11363, %v11523
  %v11525 = vpop.f32.mrf.mxu0
  %11526 = vmatprep.mubr.bf16.mxu0 %v8892
  %11527 = vmatmul.mubr.bf16.gmra.mxu0 %v8891
  %v11528 = vpop.f32.mrf.mxu0
  %v11529 = vadd.f32 %v11368, %v11528
  %v11530 = vpop.f32.mrf.mxu0
  %v11531 = vpop.f32.mrf.mxu0
  %v11532 = vadd.f32 %v11371, %v11531
  %v11533 = vpop.f32.mrf.mxu0
  %11534 = vmatprep.mubr.bf16.mxu0 %v8900
  %11535 = vmatmul.mubr.bf16.gmra.mxu0 %v8899
  %v11536 = vpop.f32.mrf.mxu0
  %v11537 = vadd.f32 %v11376, %v11536
  %v11538 = vpop.f32.mrf.mxu0
  %v11539 = vpop.f32.mrf.mxu0
  %v11540 = vadd.f32 %v11379, %v11539
  %v11541 = vpop.f32.mrf.mxu0
  %11542 = vmatprep.mubr.bf16.mxu0 %v8908
  %11543 = vmatmul.mubr.bf16.gmra.mxu0 %v8907
  %v11544 = vpop.f32.mrf.mxu0
  %v11545 = vadd.f32 %v11384, %v11544
  %v11546 = vpop.f32.mrf.mxu0
  %v11547 = vpop.f32.mrf.mxu0
  %v11548 = vadd.f32 %v11387, %v11547
  %v11549 = vpop.f32.mrf.mxu0
  %11550 = vmatprep.mubr.bf16.mxu0 %v8916
  %11551 = vmatmul.mubr.bf16.gmra.mxu0 %v8915
  %v11552 = vpop.f32.mrf.mxu0
  %v11553 = vadd.f32 %v11392, %v11552
  %v11554 = vpop.f32.mrf.mxu0
  %v11555 = vpop.f32.mrf.mxu0
  %v11556 = vadd.f32 %v11395, %v11555
  %v11557 = vpop.f32.mrf.mxu0
  %11558 = vmatprep.mubr.bf16.mxu0 %v8924
  %11559 = vmatmul.mubr.bf16.gmra.mxu0 %v8923
  %v11560 = vpop.f32.mrf.mxu0
  %v11561 = vadd.f32 %v11400, %v11560
  %v11562 = vpop.f32.mrf.mxu0
  %v11563 = vpop.f32.mrf.mxu0
  %v11564 = vadd.f32 %v11403, %v11563
  %v11565 = vpop.f32.mrf.mxu0
  %11566 = vdwg.mxu0
  %11567 = vmatprep.subr.bf16.mxu0 0
  %11568 = vmatpush1.bf16.msra.mxu0 %v8632
  %11569 = vmatprep.subr.bf16.mxu0 0
  %11570 = vmatpush1.bf16.msra.mxu0 %v8625
  %11571 = vmatprep.subr.bf16.mxu0 0
  %11572 = vmatpush1.bf16.msra.mxu0 %v8618
  %11573 = vmatprep.subr.bf16.mxu0 0
  %11574 = vmatpush1.bf16.msra.mxu0 %v8611
  %11575 = vmatprep.subr.bf16.mxu0 0
  %11576 = vmatpush1.bf16.msra.mxu0 %v8604
  %11577 = vmatprep.subr.bf16.mxu0 0
  %11578 = vmatpush1.bf16.msra.mxu0 %v8597
  %11579 = vmatprep.subr.bf16.mxu0 0
  %11580 = vmatpush1.bf16.msra.mxu0 %v8590
  %11581 = vmatprep.subr.bf16.mxu0 0
  %11582 = vmatpush1.bf16.msra.mxu0 %v8583
  %11583 = vmatprep.subr.bf16.mxu0 0
  %11584 = vmatpush2.bf16.msra.mxu0 %v8688
  %11585 = vmatprep.subr.bf16.mxu0 0
  %11586 = vmatpush2.bf16.msra.mxu0 %v8681
  %11587 = vmatprep.subr.bf16.mxu0 0
  %11588 = vmatpush2.bf16.msra.mxu0 %v8674
  %11589 = vmatprep.subr.bf16.mxu0 0
  %11590 = vmatpush2.bf16.msra.mxu0 %v8667
  %11591 = vmatprep.subr.bf16.mxu0 0
  %11592 = vmatpush2.bf16.msra.mxu0 %v8660
  %11593 = vmatprep.subr.bf16.mxu0 0
  %11594 = vmatpush2.bf16.msra.mxu0 %v8653
  %11595 = vmatprep.subr.bf16.mxu0 0
  %11596 = vmatpush2.bf16.msra.mxu0 %v8646
  %11597 = vmatprep.subr.bf16.mxu0 0
  %11598 = vmatpush2.bf16.msra.mxu0 %v8639
  %11599 = vmatprep.mubr.bf16.mxu0 %v8806
  %11600 = vmatmul.mubr.bf16.gmra.mxu0 %v8805
  %v11601 = vpop.f32.mrf.mxu0
  %v11602 = vadd.f32 %v11441, %v11601
  %v11603 = vpop.f32.mrf.mxu0
  %v11604 = vpop.f32.mrf.mxu0
  %v11605 = vadd.f32 %v11444, %v11604
  %v11606 = vpop.f32.mrf.mxu0
  %11607 = vmatprep.mubr.bf16.mxu0 %v8814
  %11608 = vmatmul.mubr.bf16.gmra.mxu0 %v8813
  %v11609 = vpop.f32.mrf.mxu0
  %v11610 = vadd.f32 %v11449, %v11609
  %v11611 = vpop.f32.mrf.mxu0
  %v11612 = vpop.f32.mrf.mxu0
  %v11613 = vadd.f32 %v11452, %v11612
  %v11614 = vpop.f32.mrf.mxu0
  %11615 = vmatprep.mubr.bf16.mxu0 %v8822
  %11616 = vmatmul.mubr.bf16.gmra.mxu0 %v8821
  %v11617 = vpop.f32.mrf.mxu0
  %v11618 = vadd.f32 %v11457, %v11617
  %v11619 = vpop.f32.mrf.mxu0
  %v11620 = vpop.f32.mrf.mxu0
  %v11621 = vadd.f32 %v11460, %v11620
  %v11622 = vpop.f32.mrf.mxu0
  %11623 = vmatprep.mubr.bf16.mxu0 %v8830
  %11624 = vmatmul.mubr.bf16.gmra.mxu0 %v8829
  %v11625 = vpop.f32.mrf.mxu0
  %v11626 = vadd.f32 %v11465, %v11625
  %v11627 = vpop.f32.mrf.mxu0
  %v11628 = vpop.f32.mrf.mxu0
  %v11629 = vadd.f32 %v11468, %v11628
  %v11630 = vpop.f32.mrf.mxu0
  %11631 = vmatprep.mubr.bf16.mxu0 %v8838
  %11632 = vmatmul.mubr.bf16.gmra.mxu0 %v8837
  %v11633 = vpop.f32.mrf.mxu0
  %v11634 = vadd.f32 %v11473, %v11633
  %v11635 = vpop.f32.mrf.mxu0
  %v11636 = vpop.f32.mrf.mxu0
  %v11637 = vadd.f32 %v11476, %v11636
  %v11638 = vpop.f32.mrf.mxu0
  %11639 = vmatprep.mubr.bf16.mxu0 %v8846
  %11640 = vmatmul.mubr.bf16.gmra.mxu0 %v8845
  %v11641 = vpop.f32.mrf.mxu0
  %v11642 = vadd.f32 %v11481, %v11641
  %v11643 = vpop.f32.mrf.mxu0
  %v11644 = vpop.f32.mrf.mxu0
  %v11645 = vadd.f32 %v11484, %v11644
  %v11646 = vpop.f32.mrf.mxu0
  %11647 = vmatprep.mubr.bf16.mxu0 %v8854
  %11648 = vmatmul.mubr.bf16.gmra.mxu0 %v8853
  %v11649 = vpop.f32.mrf.mxu0
  %v11650 = vadd.f32 %v11489, %v11649
  %v11651 = vpop.f32.mrf.mxu0
  %v11652 = vpop.f32.mrf.mxu0
  %v11653 = vadd.f32 %v11492, %v11652
  %v11654 = vpop.f32.mrf.mxu0
  %11655 = vmatprep.mubr.bf16.mxu0 %v8862
  %11656 = vmatmul.mubr.bf16.gmra.mxu0 %v8861
  %v11657 = vpop.f32.mrf.mxu0
  %v11658 = vadd.f32 %v11497, %v11657
  %v11659 = vpop.f32.mrf.mxu0
  %v11660 = vpop.f32.mrf.mxu0
  %v11661 = vadd.f32 %v11500, %v11660
  %v11662 = vpop.f32.mrf.mxu0
  %11663 = vmatprep.mubr.bf16.mxu0 %v8870
  %11664 = vmatmul.mubr.bf16.gmra.mxu0 %v8869
  %v11665 = vpop.f32.mrf.mxu0
  %v11666 = vadd.f32 %v11505, %v11665
  %v11667 = vpop.f32.mrf.mxu0
  %v11668 = vpop.f32.mrf.mxu0
  %v11669 = vadd.f32 %v11508, %v11668
  %v11670 = vpop.f32.mrf.mxu0
  %11671 = vmatprep.mubr.bf16.mxu0 %v8878
  %11672 = vmatmul.mubr.bf16.gmra.mxu0 %v8877
  %v11673 = vpop.f32.mrf.mxu0
  %v11674 = vadd.f32 %v11513, %v11673
  %v11675 = vpop.f32.mrf.mxu0
  %v11676 = vpop.f32.mrf.mxu0
  %v11677 = vadd.f32 %v11516, %v11676
  %v11678 = vpop.f32.mrf.mxu0
  %11679 = vmatprep.mubr.bf16.mxu0 %v8886
  %11680 = vmatmul.mubr.bf16.gmra.mxu0 %v8885
  %v11681 = vpop.f32.mrf.mxu0
  %v11682 = vadd.f32 %v11521, %v11681
  %v11683 = vpop.f32.mrf.mxu0
  %v11684 = vpop.f32.mrf.mxu0
  %v11685 = vadd.f32 %v11524, %v11684
  %v11686 = vpop.f32.mrf.mxu0
  %11687 = vmatprep.mubr.bf16.mxu0 %v8894
  %11688 = vmatmul.mubr.bf16.gmra.mxu0 %v8893
  %v11689 = vpop.f32.mrf.mxu0
  %v11690 = vadd.f32 %v11529, %v11689
  %v11691 = vpop.f32.mrf.mxu0
  %v11692 = vpop.f32.mrf.mxu0
  %v11693 = vadd.f32 %v11532, %v11692
  %v11694 = vpop.f32.mrf.mxu0
  %11695 = vmatprep.mubr.bf16.mxu0 %v8902
  %11696 = vmatmul.mubr.bf16.gmra.mxu0 %v8901
  %v11697 = vpop.f32.mrf.mxu0
  %v11698 = vadd.f32 %v11537, %v11697
  %v11699 = vpop.f32.mrf.mxu0
  %v11700 = vpop.f32.mrf.mxu0
  %v11701 = vadd.f32 %v11540, %v11700
  %v11702 = vpop.f32.mrf.mxu0
  %11703 = vmatprep.mubr.bf16.mxu0 %v8910
  %11704 = vmatmul.mubr.bf16.gmra.mxu0 %v8909
  %v11705 = vpop.f32.mrf.mxu0
  %v11706 = vadd.f32 %v11545, %v11705
  %v11707 = vpop.f32.mrf.mxu0
  %v11708 = vpop.f32.mrf.mxu0
  %v11709 = vadd.f32 %v11548, %v11708
  %v11710 = vpop.f32.mrf.mxu0
  %11711 = vmatprep.mubr.bf16.mxu0 %v8918
  %11712 = vmatmul.mubr.bf16.gmra.mxu0 %v8917
  %v11713 = vpop.f32.mrf.mxu0
  %v11714 = vadd.f32 %v11553, %v11713
  %v11715 = vpop.f32.mrf.mxu0
  %v11716 = vpop.f32.mrf.mxu0
  %v11717 = vadd.f32 %v11556, %v11716
  %v11718 = vpop.f32.mrf.mxu0
  %11719 = vmatprep.mubr.bf16.mxu0 %v8926
  %11720 = vmatmul.mubr.bf16.gmra.mxu0 %v8925
  %v11721 = vpop.f32.mrf.mxu0
  %v11722 = vadd.f32 %v11561, %v11721
  %v11723 = vpop.f32.mrf.mxu0
  %v11724 = vpop.f32.mrf.mxu0
  %v11725 = vadd.f32 %v11564, %v11724
  %v11726 = vpop.f32.mrf.mxu0
  %11727 = vdwg.mxu0
  %11728 = vmatprep.subr.bf16.mxu0 0
  %11729 = vmatpush1.bf16.msra.mxu0 %v8744
  %11730 = vmatprep.subr.bf16.mxu0 0
  %11731 = vmatpush1.bf16.msra.mxu0 %v8737
  %11732 = vmatprep.subr.bf16.mxu0 0
  %11733 = vmatpush1.bf16.msra.mxu0 %v8730
  %11734 = vmatprep.subr.bf16.mxu0 0
  %11735 = vmatpush1.bf16.msra.mxu0 %v8723
  %11736 = vmatprep.subr.bf16.mxu0 0
  %11737 = vmatpush1.bf16.msra.mxu0 %v8716
  %11738 = vmatprep.subr.bf16.mxu0 0
  %11739 = vmatpush1.bf16.msra.mxu0 %v8709
  %11740 = vmatprep.subr.bf16.mxu0 0
  %11741 = vmatpush1.bf16.msra.mxu0 %v8702
  %11742 = vmatprep.subr.bf16.mxu0 0
  %11743 = vmatpush1.bf16.msra.mxu0 %v8695
  %11744 = vmatprep.subr.bf16.mxu0 0
  %11745 = vmatpush2.bf16.msra.mxu0 %v8800
  %11746 = vmatprep.subr.bf16.mxu0 0
  %11747 = vmatpush2.bf16.msra.mxu0 %v8793
  %11748 = vmatprep.subr.bf16.mxu0 0
  %11749 = vmatpush2.bf16.msra.mxu0 %v8786
  %11750 = vmatprep.subr.bf16.mxu0 0
  %11751 = vmatpush2.bf16.msra.mxu0 %v8779
  %11752 = vmatprep.subr.bf16.mxu0 0
  %11753 = vmatpush2.bf16.msra.mxu0 %v8772
  %11754 = vmatprep.subr.bf16.mxu0 0
  %11755 = vmatpush2.bf16.msra.mxu0 %v8765
  %11756 = vmatprep.subr.bf16.mxu0 0
  %11757 = vmatpush2.bf16.msra.mxu0 %v8758
  %11758 = vmatprep.subr.bf16.mxu0 0
  %11759 = vmatpush2.bf16.msra.mxu0 %v8751
  %11760 = vmatprep.mubr.bf16.mxu0 %v8808
  %11761 = vmatmul.mubr.bf16.gmra.mxu0 %v8807
  %v11762 = vpop.f32.mrf.mxu0
  %v11763 = vadd.f32 %v11602, %v11762
  %v11764 = vpop.f32.mrf.mxu0
  %v11765 = vpop.f32.mrf.mxu0
  %v11766 = vadd.f32 %v11605, %v11765
  %v11767 = vpop.f32.mrf.mxu0
  %11768 = vmatprep.mubr.bf16.mxu0 %v8816
  %11769 = vmatmul.mubr.bf16.gmra.mxu0 %v8815
  %v11770 = vpop.f32.mrf.mxu0
  %v11771 = vadd.f32 %v11610, %v11770
  %v11772 = vpop.f32.mrf.mxu0
  %v11773 = vpop.f32.mrf.mxu0
  %v11774 = vadd.f32 %v11613, %v11773
  %v11775 = vpop.f32.mrf.mxu0
  %11776 = vmatprep.mubr.bf16.mxu0 %v8824
  %11777 = vmatmul.mubr.bf16.gmra.mxu0 %v8823
  %v11778 = vpop.f32.mrf.mxu0
  %v11779 = vadd.f32 %v11618, %v11778
  %v11780 = vpop.f32.mrf.mxu0
  %v11781 = vpop.f32.mrf.mxu0
  %v11782 = vadd.f32 %v11621, %v11781
  %v11783 = vpop.f32.mrf.mxu0
  %11784 = vmatprep.mubr.bf16.mxu0 %v8832
  %11785 = vmatmul.mubr.bf16.gmra.mxu0 %v8831
  %v11786 = vpop.f32.mrf.mxu0
  %v11787 = vadd.f32 %v11626, %v11786
  %v11788 = vpop.f32.mrf.mxu0
  %v11789 = vpop.f32.mrf.mxu0
  %v11790 = vadd.f32 %v11629, %v11789
  %v11791 = vpop.f32.mrf.mxu0
  %11792 = vmatprep.mubr.bf16.mxu0 %v8840
  %11793 = vmatmul.mubr.bf16.gmra.mxu0 %v8839
  %v11794 = vpop.f32.mrf.mxu0
  %v11795 = vadd.f32 %v11634, %v11794
  %v11796 = vpop.f32.mrf.mxu0
  %v11797 = vpop.f32.mrf.mxu0
  %v11798 = vadd.f32 %v11637, %v11797
  %v11799 = vpop.f32.mrf.mxu0
  %11800 = vmatprep.mubr.bf16.mxu0 %v8848
  %11801 = vmatmul.mubr.bf16.gmra.mxu0 %v8847
  %v11802 = vpop.f32.mrf.mxu0
  %v11803 = vadd.f32 %v11642, %v11802
  %v11804 = vpop.f32.mrf.mxu0
  %v11805 = vpop.f32.mrf.mxu0
  %v11806 = vadd.f32 %v11645, %v11805
  %v11807 = vpop.f32.mrf.mxu0
  %11808 = vmatprep.mubr.bf16.mxu0 %v8856
  %11809 = vmatmul.mubr.bf16.gmra.mxu0 %v8855
  %v11810 = vpop.f32.mrf.mxu0
  %v11811 = vadd.f32 %v11650, %v11810
  %v11812 = vpop.f32.mrf.mxu0
  %v11813 = vpop.f32.mrf.mxu0
  %v11814 = vadd.f32 %v11653, %v11813
  %v11815 = vpop.f32.mrf.mxu0
  %11816 = vmatprep.mubr.bf16.mxu0 %v8864
  %11817 = vmatmul.mubr.bf16.gmra.mxu0 %v8863
  %v11818 = vpop.f32.mrf.mxu0
  %v11819 = vadd.f32 %v11658, %v11818
  %v11820 = vpop.f32.mrf.mxu0
  %v11821 = vpop.f32.mrf.mxu0
  %v11822 = vadd.f32 %v11661, %v11821
  %v11823 = vpop.f32.mrf.mxu0
  %11824 = vmatprep.mubr.bf16.mxu0 %v8872
  %11825 = vmatmul.mubr.bf16.gmra.mxu0 %v8871
  %v11826 = vpop.f32.mrf.mxu0
  %v11827 = vadd.f32 %v11666, %v11826
  %v11828 = vpop.f32.mrf.mxu0
  %v11829 = vpop.f32.mrf.mxu0
  %v11830 = vadd.f32 %v11669, %v11829
  %v11831 = vpop.f32.mrf.mxu0
  %11832 = vmatprep.mubr.bf16.mxu0 %v8880
  %11833 = vmatmul.mubr.bf16.gmra.mxu0 %v8879
  %v11834 = vpop.f32.mrf.mxu0
  %v11835 = vadd.f32 %v11674, %v11834
  %v11836 = vpop.f32.mrf.mxu0
  %v11837 = vpop.f32.mrf.mxu0
  %v11838 = vadd.f32 %v11677, %v11837
  %v11839 = vpop.f32.mrf.mxu0
  %11840 = vmatprep.mubr.bf16.mxu0 %v8888
  %11841 = vmatmul.mubr.bf16.gmra.mxu0 %v8887
  %v11842 = vpop.f32.mrf.mxu0
  %v11843 = vadd.f32 %v11682, %v11842
  %v11844 = vpop.f32.mrf.mxu0
  %v11845 = vpop.f32.mrf.mxu0
  %v11846 = vadd.f32 %v11685, %v11845
  %v11847 = vpop.f32.mrf.mxu0
  %11848 = vmatprep.mubr.bf16.mxu0 %v8896
  %11849 = vmatmul.mubr.bf16.gmra.mxu0 %v8895
  %v11850 = vpop.f32.mrf.mxu0
  %v11851 = vadd.f32 %v11690, %v11850
  %v11852 = vpop.f32.mrf.mxu0
  %v11853 = vpop.f32.mrf.mxu0
  %v11854 = vadd.f32 %v11693, %v11853
  %v11855 = vpop.f32.mrf.mxu0
  %11856 = vmatprep.mubr.bf16.mxu0 %v8904
  %11857 = vmatmul.mubr.bf16.gmra.mxu0 %v8903
  %v11858 = vpop.f32.mrf.mxu0
  %v11859 = vadd.f32 %v11698, %v11858
  %v11860 = vpop.f32.mrf.mxu0
  %v11861 = vpop.f32.mrf.mxu0
  %v11862 = vadd.f32 %v11701, %v11861
  %v11863 = vpop.f32.mrf.mxu0
  %11864 = vmatprep.mubr.bf16.mxu0 %v8912
  %11865 = vmatmul.mubr.bf16.gmra.mxu0 %v8911
  %v11866 = vpop.f32.mrf.mxu0
  %v11867 = vadd.f32 %v11706, %v11866
  %v11868 = vpop.f32.mrf.mxu0
  %v11869 = vpop.f32.mrf.mxu0
  %v11870 = vadd.f32 %v11709, %v11869
  %v11871 = vpop.f32.mrf.mxu0
  %11872 = vmatprep.mubr.bf16.mxu0 %v8920
  %11873 = vmatmul.mubr.bf16.gmra.mxu0 %v8919
  %v11874 = vpop.f32.mrf.mxu0
  %v11875 = vadd.f32 %v11714, %v11874
  %v11876 = vpop.f32.mrf.mxu0
  %v11877 = vpop.f32.mrf.mxu0
  %v11878 = vadd.f32 %v11717, %v11877
  %v11879 = vpop.f32.mrf.mxu0
  %11880 = vmatprep.mubr.bf16.mxu0 %v8928
  %11881 = vmatmul.mubr.bf16.gmra.mxu0 %v8927
  %v11882 = vpop.f32.mrf.mxu0
  %v11883 = vadd.f32 %v11722, %v11882
  %v11884 = vpop.f32.mrf.mxu0
  %v11885 = vpop.f32.mrf.mxu0
  %v11886 = vadd.f32 %v11725, %v11885
  %v11887 = vpop.f32.mrf.mxu0
  %11888 = vdwg.mxu0
  %v11889 = vld [vmem:[%s14] sm:$0x7f]
  %v11891 = vlaneseq
  %v11892 = vshrl.u32 %v11891, 7
  %v11893 = vsub.s32 0, %v11892
  %v11894 = vrot.slane %v11889, %v11893
  %v11895 = vlaneseq
  %v11896 = vshrl.u32 %v11895, 7
  %v11897 = vsub.s32 1, %v11896
  %v11898 = vrot.slane %v11889, %v11897
  %v11899 = vlaneseq
  %v11900 = vshrl.u32 %v11899, 7
  %v11901 = vsub.s32 2, %v11900
  %v11902 = vrot.slane %v11889, %v11901
  %v11903 = vlaneseq
  %v11904 = vshrl.u32 %v11903, 7
  %v11905 = vsub.s32 3, %v11904
  %v11906 = vrot.slane %v11889, %v11905
  %v11907 = vlaneseq
  %v11908 = vshrl.u32 %v11907, 7
  %v11909 = vsub.s32 4, %v11908
  %v11910 = vrot.slane %v11889, %v11909
  %v11911 = vlaneseq
  %v11912 = vshrl.u32 %v11911, 7
  %v11913 = vsub.s32 5, %v11912
  %v11914 = vrot.slane %v11889, %v11913
  %v11915 = vlaneseq
  %v11916 = vshrl.u32 %v11915, 7
  %v11917 = vsub.s32 6, %v11916
  %v11918 = vrot.slane %v11889, %v11917
  %v11926 = vmul.f32 %v9543, %v11894
  %v11927 = vmul.f32 %v9545, %v11898
  %v11928 = vmul.f32 %v10315, %v11902
  %v11929 = vmul.f32 %v10317, %v11906
  %v11930 = vmul.f32 %v11087, %v11910
  %v11931 = vmul.f32 %v11089, %v11914
  %v11932 = vmul.f32 %v11763, %v11918
  %v11933 = vmul.f32 %v9547, %v11894
  %v11934 = vmul.f32 %v9549, %v11898
  %v11935 = vmul.f32 %v10319, %v11902
  %v11936 = vmul.f32 %v10321, %v11906
  %v11937 = vmul.f32 %v11091, %v11910
  %v11938 = vmul.f32 %v11093, %v11914
  %v11939 = vmul.f32 %v11766, %v11918
  %v11940 = vmul.f32 %v9553, %v11894
  %v11941 = vmul.f32 %v9555, %v11898
  %v11942 = vmul.f32 %v10325, %v11902
  %v11943 = vmul.f32 %v10327, %v11906
  %v11944 = vmul.f32 %v11097, %v11910
  %v11945 = vmul.f32 %v11099, %v11914
  %v11946 = vmul.f32 %v11771, %v11918
  %v11947 = vmul.f32 %v9557, %v11894
  %v11948 = vmul.f32 %v9559, %v11898
  %v11949 = vmul.f32 %v10329, %v11902
  %v11950 = vmul.f32 %v10331, %v11906
  %v11951 = vmul.f32 %v11101, %v11910
  %v11952 = vmul.f32 %v11103, %v11914
  %v11953 = vmul.f32 %v11774, %v11918
  %v11954 = vmul.f32 %v9563, %v11894
  %v11955 = vmul.f32 %v9565, %v11898
  %v11956 = vmul.f32 %v10335, %v11902
  %v11957 = vmul.f32 %v10337, %v11906
  %v11958 = vmul.f32 %v11107, %v11910
  %v11959 = vmul.f32 %v11109, %v11914
  %v11960 = vmul.f32 %v11779, %v11918
  %v11961 = vmul.f32 %v9567, %v11894
  %v11962 = vmul.f32 %v9569, %v11898
  %v11963 = vmul.f32 %v10339, %v11902
  %v11964 = vmul.f32 %v10341, %v11906
  %v11965 = vmul.f32 %v11111, %v11910
  %v11966 = vmul.f32 %v11113, %v11914
  %v11967 = vmul.f32 %v11782, %v11918
  %v11968 = vmul.f32 %v9573, %v11894
  %v11969 = vmul.f32 %v9575, %v11898
  %v11970 = vmul.f32 %v10345, %v11902
  %v11971 = vmul.f32 %v10347, %v11906
  %v11972 = vmul.f32 %v11117, %v11910
  %v11973 = vmul.f32 %v11119, %v11914
  %v11974 = vmul.f32 %v11787, %v11918
  %v11975 = vmul.f32 %v9577, %v11894
  %v11976 = vmul.f32 %v9579, %v11898
  %v11977 = vmul.f32 %v10349, %v11902
  %v11978 = vmul.f32 %v10351, %v11906
  %v11979 = vmul.f32 %v11121, %v11910
  %v11980 = vmul.f32 %v11123, %v11914
  %v11981 = vmul.f32 %v11790, %v11918
  %v11982 = vmul.f32 %v9583, %v11894
  %v11983 = vmul.f32 %v9585, %v11898
  %v11984 = vmul.f32 %v10355, %v11902
  %v11985 = vmul.f32 %v10357, %v11906
  %v11986 = vmul.f32 %v11127, %v11910
  %v11987 = vmul.f32 %v11129, %v11914
  %v11988 = vmul.f32 %v11795, %v11918
  %v11989 = vmul.f32 %v9587, %v11894
  %v11990 = vmul.f32 %v9589, %v11898
  %v11991 = vmul.f32 %v10359, %v11902
  %v11992 = vmul.f32 %v10361, %v11906
  %v11993 = vmul.f32 %v11131, %v11910
  %v11994 = vmul.f32 %v11133, %v11914
  %v11995 = vmul.f32 %v11798, %v11918
  %v11996 = vmul.f32 %v9593, %v11894
  %v11997 = vmul.f32 %v9595, %v11898
  %v11998 = vmul.f32 %v10365, %v11902
  %v11999 = vmul.f32 %v10367, %v11906
  %v12000 = vmul.f32 %v11137, %v11910
  %v12001 = vmul.f32 %v11139, %v11914
  %v12002 = vmul.f32 %v11803, %v11918
  %v12003 = vmul.f32 %v9597, %v11894
  %v12004 = vmul.f32 %v9599, %v11898
  %v12005 = vmul.f32 %v10369, %v11902
  %v12006 = vmul.f32 %v10371, %v11906
  %v12007 = vmul.f32 %v11141, %v11910
  %v12008 = vmul.f32 %v11143, %v11914
  %v12009 = vmul.f32 %v11806, %v11918
  %v12010 = vmul.f32 %v9603, %v11894
  %v12011 = vmul.f32 %v9605, %v11898
  %v12012 = vmul.f32 %v10375, %v11902
  %v12013 = vmul.f32 %v10377, %v11906
  %v12014 = vmul.f32 %v11147, %v11910
  %v12015 = vmul.f32 %v11149, %v11914
  %v12016 = vmul.f32 %v11811, %v11918
  %v12017 = vmul.f32 %v9607, %v11894
  %v12018 = vmul.f32 %v9609, %v11898
  %v12019 = vmul.f32 %v10379, %v11902
  %v12020 = vmul.f32 %v10381, %v11906
  %v12021 = vmul.f32 %v11151, %v11910
  %v12022 = vmul.f32 %v11153, %v11914
  %v12023 = vmul.f32 %v11814, %v11918
  %v12024 = vmul.f32 %v9613, %v11894
  %v12025 = vmul.f32 %v9615, %v11898
  %v12026 = vmul.f32 %v10385, %v11902
  %v12027 = vmul.f32 %v10387, %v11906
  %v12028 = vmul.f32 %v11157, %v11910
  %v12029 = vmul.f32 %v11159, %v11914
  %v12030 = vmul.f32 %v11819, %v11918
  %v12031 = vmul.f32 %v9617, %v11894
  %v12032 = vmul.f32 %v9619, %v11898
  %v12033 = vmul.f32 %v10389, %v11902
  %v12034 = vmul.f32 %v10391, %v11906
  %v12035 = vmul.f32 %v11161, %v11910
  %v12036 = vmul.f32 %v11163, %v11914
  %v12037 = vmul.f32 %v11822, %v11918
  %v12038 = vmul.f32 %v9623, %v11894
  %v12039 = vmul.f32 %v9625, %v11898
  %v12040 = vmul.f32 %v10395, %v11902
  %v12041 = vmul.f32 %v10397, %v11906
  %v12042 = vmul.f32 %v11167, %v11910
  %v12043 = vmul.f32 %v11169, %v11914
  %v12044 = vmul.f32 %v11827, %v11918
  %v12045 = vmul.f32 %v9627, %v11894
  %v12046 = vmul.f32 %v9629, %v11898
  %v12047 = vmul.f32 %v10399, %v11902
  %v12048 = vmul.f32 %v10401, %v11906
  %v12049 = vmul.f32 %v11171, %v11910
  %v12050 = vmul.f32 %v11173, %v11914
  %v12051 = vmul.f32 %v11830, %v11918
  %v12052 = vmul.f32 %v9633, %v11894
  %v12053 = vmul.f32 %v9635, %v11898
  %v12054 = vmul.f32 %v10405, %v11902
  %v12055 = vmul.f32 %v10407, %v11906
  %v12056 = vmul.f32 %v11177, %v11910
  %v12057 = vmul.f32 %v11179, %v11914
  %v12058 = vmul.f32 %v11835, %v11918
  %v12059 = vmul.f32 %v9637, %v11894
  %v12060 = vmul.f32 %v9639, %v11898
  %v12061 = vmul.f32 %v10409, %v11902
  %v12062 = vmul.f32 %v10411, %v11906
  %v12063 = vmul.f32 %v11181, %v11910
  %v12064 = vmul.f32 %v11183, %v11914
  %v12065 = vmul.f32 %v11838, %v11918
  %v12066 = vmul.f32 %v9643, %v11894
  %v12067 = vmul.f32 %v9645, %v11898
  %v12068 = vmul.f32 %v10415, %v11902
  %v12069 = vmul.f32 %v10417, %v11906
  %v12070 = vmul.f32 %v11187, %v11910
  %v12071 = vmul.f32 %v11189, %v11914
  %v12072 = vmul.f32 %v11843, %v11918
  %v12073 = vmul.f32 %v9647, %v11894
  %v12074 = vmul.f32 %v9649, %v11898
  %v12075 = vmul.f32 %v10419, %v11902
  %v12076 = vmul.f32 %v10421, %v11906
  %v12077 = vmul.f32 %v11191, %v11910
  %v12078 = vmul.f32 %v11193, %v11914
  %v12079 = vmul.f32 %v11846, %v11918
  %v12080 = vmul.f32 %v9653, %v11894
  %v12081 = vmul.f32 %v9655, %v11898
  %v12082 = vmul.f32 %v10425, %v11902
  %v12083 = vmul.f32 %v10427, %v11906
  %v12084 = vmul.f32 %v11197, %v11910
  %v12085 = vmul.f32 %v11199, %v11914
  %v12086 = vmul.f32 %v11851, %v11918
  %v12087 = vmul.f32 %v9657, %v11894
  %v12088 = vmul.f32 %v9659, %v11898
  %v12089 = vmul.f32 %v10429, %v11902
  %v12090 = vmul.f32 %v10431, %v11906
  %v12091 = vmul.f32 %v11201, %v11910
  %v12092 = vmul.f32 %v11203, %v11914
  %v12093 = vmul.f32 %v11854, %v11918
  %v12094 = vmul.f32 %v9663, %v11894
  %v12095 = vmul.f32 %v9665, %v11898
  %v12096 = vmul.f32 %v10435, %v11902
  %v12097 = vmul.f32 %v10437, %v11906
  %v12098 = vmul.f32 %v11207, %v11910
  %v12099 = vmul.f32 %v11209, %v11914
  %v12100 = vmul.f32 %v11859, %v11918
  %v12101 = vmul.f32 %v9667, %v11894
  %v12102 = vmul.f32 %v9669, %v11898
  %v12103 = vmul.f32 %v10439, %v11902
  %v12104 = vmul.f32 %v10441, %v11906
  %v12105 = vmul.f32 %v11211, %v11910
  %v12106 = vmul.f32 %v11213, %v11914
  %v12107 = vmul.f32 %v11862, %v11918
  %v12108 = vmul.f32 %v9673, %v11894
  %v12109 = vmul.f32 %v9675, %v11898
  %v12110 = vmul.f32 %v10445, %v11902
  %v12111 = vmul.f32 %v10447, %v11906
  %v12112 = vmul.f32 %v11217, %v11910
  %v12113 = vmul.f32 %v11219, %v11914
  %v12114 = vmul.f32 %v11867, %v11918
  %v12115 = vmul.f32 %v9677, %v11894
  %v12116 = vmul.f32 %v9679, %v11898
  %v12117 = vmul.f32 %v10449, %v11902
  %v12118 = vmul.f32 %v10451, %v11906
  %v12119 = vmul.f32 %v11221, %v11910
  %v12120 = vmul.f32 %v11223, %v11914
  %v12121 = vmul.f32 %v11870, %v11918
  %v12122 = vmul.f32 %v9683, %v11894
  %v12123 = vmul.f32 %v9685, %v11898
  %v12124 = vmul.f32 %v10455, %v11902
  %v12125 = vmul.f32 %v10457, %v11906
  %v12126 = vmul.f32 %v11227, %v11910
  %v12127 = vmul.f32 %v11229, %v11914
  %v12128 = vmul.f32 %v11875, %v11918
  %v12129 = vmul.f32 %v9687, %v11894
  %v12130 = vmul.f32 %v9689, %v11898
  %v12131 = vmul.f32 %v10459, %v11902
  %v12132 = vmul.f32 %v10461, %v11906
  %v12133 = vmul.f32 %v11231, %v11910
  %v12134 = vmul.f32 %v11233, %v11914
  %v12135 = vmul.f32 %v11878, %v11918
  %v12136 = vmul.f32 %v9693, %v11894
  %v12137 = vmul.f32 %v9695, %v11898
  %v12138 = vmul.f32 %v10465, %v11902
  %v12139 = vmul.f32 %v10467, %v11906
  %v12140 = vmul.f32 %v11237, %v11910
  %v12141 = vmul.f32 %v11239, %v11914
  %v12142 = vmul.f32 %v11883, %v11918
  %v12143 = vmul.f32 %v9697, %v11894
  %v12144 = vmul.f32 %v9699, %v11898
  %v12145 = vmul.f32 %v10469, %v11902
  %v12146 = vmul.f32 %v10471, %v11906
  %v12147 = vmul.f32 %v11241, %v11910
  %v12148 = vmul.f32 %v11243, %v11914
  %v12149 = vmul.f32 %v11886, %v11918
  %v12150 = vld [vmem:[%s15] sm:$0x7f]
  %v12152 = vlaneseq
  %v12153 = vshrl.u32 %v12152, 7
  %v12154 = vsub.s32 0, %v12153
  %v12155 = vrot.slane %v12150, %v12154
  %v12156 = vlaneseq
  %v12157 = vshrl.u32 %v12156, 7
  %v12158 = vsub.s32 1, %v12157
  %v12159 = vrot.slane %v12150, %v12158
  %v12160 = vlaneseq
  %v12161 = vshrl.u32 %v12160, 7
  %v12162 = vsub.s32 2, %v12161
  %v12163 = vrot.slane %v12150, %v12162
  %v12164 = vlaneseq
  %v12165 = vshrl.u32 %v12164, 7
  %v12166 = vsub.s32 3, %v12165
  %v12167 = vrot.slane %v12150, %v12166
  %v12168 = vlaneseq
  %v12169 = vshrl.u32 %v12168, 7
  %v12170 = vsub.s32 4, %v12169
  %v12171 = vrot.slane %v12150, %v12170
  %v12172 = vlaneseq
  %v12173 = vshrl.u32 %v12172, 7
  %v12174 = vsub.s32 5, %v12173
  %v12175 = vrot.slane %v12150, %v12174
  %v12176 = vlaneseq
  %v12177 = vshrl.u32 %v12176, 7
  %v12178 = vsub.s32 6, %v12177
  %v12179 = vrot.slane %v12150, %v12178
  %v12187 = vadd.f32 %v11926, %v12155
  %v12188 = vadd.f32 %v11927, %v12159
  %v12189 = vadd.f32 %v11928, %v12163
  %v12190 = vadd.f32 %v11929, %v12167
  %v12191 = vadd.f32 %v11930, %v12171
  %v12192 = vadd.f32 %v11931, %v12175
  %v12193 = vadd.f32 %v11932, %v12179
  %v12194 = vadd.f32 %v11933, %v12155
  %v12195 = vadd.f32 %v11934, %v12159
  %v12196 = vadd.f32 %v11935, %v12163
  %v12197 = vadd.f32 %v11936, %v12167
  %v12198 = vadd.f32 %v11937, %v12171
  %v12199 = vadd.f32 %v11938, %v12175
  %v12200 = vadd.f32 %v11939, %v12179
  %v12201 = vadd.f32 %v11940, %v12155
  %v12202 = vadd.f32 %v11941, %v12159
  %v12203 = vadd.f32 %v11942, %v12163
  %v12204 = vadd.f32 %v11943, %v12167
  %v12205 = vadd.f32 %v11944, %v12171
  %v12206 = vadd.f32 %v11945, %v12175
  %v12207 = vadd.f32 %v11946, %v12179
  %v12208 = vadd.f32 %v11947, %v12155
  %v12209 = vadd.f32 %v11948, %v12159
  %v12210 = vadd.f32 %v11949, %v12163
  %v12211 = vadd.f32 %v11950, %v12167
  %v12212 = vadd.f32 %v11951, %v12171
  %v12213 = vadd.f32 %v11952, %v12175
  %v12214 = vadd.f32 %v11953, %v12179
  %v12215 = vadd.f32 %v11954, %v12155
  %v12216 = vadd.f32 %v11955, %v12159
  %v12217 = vadd.f32 %v11956, %v12163
  %v12218 = vadd.f32 %v11957, %v12167
  %v12219 = vadd.f32 %v11958, %v12171
  %v12220 = vadd.f32 %v11959, %v12175
  %v12221 = vadd.f32 %v11960, %v12179
  %v12222 = vadd.f32 %v11961, %v12155
  %v12223 = vadd.f32 %v11962, %v12159
  %v12224 = vadd.f32 %v11963, %v12163
  %v12225 = vadd.f32 %v11964, %v12167
  %v12226 = vadd.f32 %v11965, %v12171
  %v12227 = vadd.f32 %v11966, %v12175
  %v12228 = vadd.f32 %v11967, %v12179
  %v12229 = vadd.f32 %v11968, %v12155
  %v12230 = vadd.f32 %v11969, %v12159
  %v12231 = vadd.f32 %v11970, %v12163
  %v12232 = vadd.f32 %v11971, %v12167
  %v12233 = vadd.f32 %v11972, %v12171
  %v12234 = vadd.f32 %v11973, %v12175
  %v12235 = vadd.f32 %v11974, %v12179
  %v12236 = vadd.f32 %v11975, %v12155
  %v12237 = vadd.f32 %v11976, %v12159
  %v12238 = vadd.f32 %v11977, %v12163
  %v12239 = vadd.f32 %v11978, %v12167
  %v12240 = vadd.f32 %v11979, %v12171
  %v12241 = vadd.f32 %v11980, %v12175
  %v12242 = vadd.f32 %v11981, %v12179
  %v12243 = vadd.f32 %v11982, %v12155
  %v12244 = vadd.f32 %v11983, %v12159
  %v12245 = vadd.f32 %v11984, %v12163
  %v12246 = vadd.f32 %v11985, %v12167
  %v12247 = vadd.f32 %v11986, %v12171
  %v12248 = vadd.f32 %v11987, %v12175
  %v12249 = vadd.f32 %v11988, %v12179
  %v12250 = vadd.f32 %v11989, %v12155
  %v12251 = vadd.f32 %v11990, %v12159
  %v12252 = vadd.f32 %v11991, %v12163
  %v12253 = vadd.f32 %v11992, %v12167
  %v12254 = vadd.f32 %v11993, %v12171
  %v12255 = vadd.f32 %v11994, %v12175
  %v12256 = vadd.f32 %v11995, %v12179
  %v12257 = vadd.f32 %v11996, %v12155
  %v12258 = vadd.f32 %v11997, %v12159
  %v12259 = vadd.f32 %v11998, %v12163
  %v12260 = vadd.f32 %v11999, %v12167
  %v12261 = vadd.f32 %v12000, %v12171
  %v12262 = vadd.f32 %v12001, %v12175
  %v12263 = vadd.f32 %v12002, %v12179
  %v12264 = vadd.f32 %v12003, %v12155
  %v12265 = vadd.f32 %v12004, %v12159
  %v12266 = vadd.f32 %v12005, %v12163
  %v12267 = vadd.f32 %v12006, %v12167
  %v12268 = vadd.f32 %v12007, %v12171
  %v12269 = vadd.f32 %v12008, %v12175
  %v12270 = vadd.f32 %v12009, %v12179
  %v12271 = vadd.f32 %v12010, %v12155
  %v12272 = vadd.f32 %v12011, %v12159
  %v12273 = vadd.f32 %v12012, %v12163
  %v12274 = vadd.f32 %v12013, %v12167
  %v12275 = vadd.f32 %v12014, %v12171
  %v12276 = vadd.f32 %v12015, %v12175
  %v12277 = vadd.f32 %v12016, %v12179
  %v12278 = vadd.f32 %v12017, %v12155
  %v12279 = vadd.f32 %v12018, %v12159
  %v12280 = vadd.f32 %v12019, %v12163
  %v12281 = vadd.f32 %v12020, %v12167
  %v12282 = vadd.f32 %v12021, %v12171
  %v12283 = vadd.f32 %v12022, %v12175
  %v12284 = vadd.f32 %v12023, %v12179
  %v12285 = vadd.f32 %v12024, %v12155
  %v12286 = vadd.f32 %v12025, %v12159
  %v12287 = vadd.f32 %v12026, %v12163
  %v12288 = vadd.f32 %v12027, %v12167
  %v12289 = vadd.f32 %v12028, %v12171
  %v12290 = vadd.f32 %v12029, %v12175
  %v12291 = vadd.f32 %v12030, %v12179
  %v12292 = vadd.f32 %v12031, %v12155
  %v12293 = vadd.f32 %v12032, %v12159
  %v12294 = vadd.f32 %v12033, %v12163
  %v12295 = vadd.f32 %v12034, %v12167
  %v12296 = vadd.f32 %v12035, %v12171
  %v12297 = vadd.f32 %v12036, %v12175
  %v12298 = vadd.f32 %v12037, %v12179
  %v12299 = vadd.f32 %v12038, %v12155
  %v12300 = vadd.f32 %v12039, %v12159
  %v12301 = vadd.f32 %v12040, %v12163
  %v12302 = vadd.f32 %v12041, %v12167
  %v12303 = vadd.f32 %v12042, %v12171
  %v12304 = vadd.f32 %v12043, %v12175
  %v12305 = vadd.f32 %v12044, %v12179
  %v12306 = vadd.f32 %v12045, %v12155
  %v12307 = vadd.f32 %v12046, %v12159
  %v12308 = vadd.f32 %v12047, %v12163
  %v12309 = vadd.f32 %v12048, %v12167
  %v12310 = vadd.f32 %v12049, %v12171
  %v12311 = vadd.f32 %v12050, %v12175
  %v12312 = vadd.f32 %v12051, %v12179
  %v12313 = vadd.f32 %v12052, %v12155
  %v12314 = vadd.f32 %v12053, %v12159
  %v12315 = vadd.f32 %v12054, %v12163
  %v12316 = vadd.f32 %v12055, %v12167
  %v12317 = vadd.f32 %v12056, %v12171
  %v12318 = vadd.f32 %v12057, %v12175
  %v12319 = vadd.f32 %v12058, %v12179
  %v12320 = vadd.f32 %v12059, %v12155
  %v12321 = vadd.f32 %v12060, %v12159
  %v12322 = vadd.f32 %v12061, %v12163
  %v12323 = vadd.f32 %v12062, %v12167
  %v12324 = vadd.f32 %v12063, %v12171
  %v12325 = vadd.f32 %v12064, %v12175
  %v12326 = vadd.f32 %v12065, %v12179
  %v12327 = vadd.f32 %v12066, %v12155
  %v12328 = vadd.f32 %v12067, %v12159
  %v12329 = vadd.f32 %v12068, %v12163
  %v12330 = vadd.f32 %v12069, %v12167
  %v12331 = vadd.f32 %v12070, %v12171
  %v12332 = vadd.f32 %v12071, %v12175
  %v12333 = vadd.f32 %v12072, %v12179
  %v12334 = vadd.f32 %v12073, %v12155
  %v12335 = vadd.f32 %v12074, %v12159
  %v12336 = vadd.f32 %v12075, %v12163
  %v12337 = vadd.f32 %v12076, %v12167
  %v12338 = vadd.f32 %v12077, %v12171
  %v12339 = vadd.f32 %v12078, %v12175
  %v12340 = vadd.f32 %v12079, %v12179
  %v12341 = vadd.f32 %v12080, %v12155
  %v12342 = vadd.f32 %v12081, %v12159
  %v12343 = vadd.f32 %v12082, %v12163
  %v12344 = vadd.f32 %v12083, %v12167
  %v12345 = vadd.f32 %v12084, %v12171
  %v12346 = vadd.f32 %v12085, %v12175
  %v12347 = vadd.f32 %v12086, %v12179
  %v12348 = vadd.f32 %v12087, %v12155
  %v12349 = vadd.f32 %v12088, %v12159
  %v12350 = vadd.f32 %v12089, %v12163
  %v12351 = vadd.f32 %v12090, %v12167
  %v12352 = vadd.f32 %v12091, %v12171
  %v12353 = vadd.f32 %v12092, %v12175
  %v12354 = vadd.f32 %v12093, %v12179
  %v12355 = vadd.f32 %v12094, %v12155
  %v12356 = vadd.f32 %v12095, %v12159
  %v12357 = vadd.f32 %v12096, %v12163
  %v12358 = vadd.f32 %v12097, %v12167
  %v12359 = vadd.f32 %v12098, %v12171
  %v12360 = vadd.f32 %v12099, %v12175
  %v12361 = vadd.f32 %v12100, %v12179
  %v12362 = vadd.f32 %v12101, %v12155
  %v12363 = vadd.f32 %v12102, %v12159
  %v12364 = vadd.f32 %v12103, %v12163
  %v12365 = vadd.f32 %v12104, %v12167
  %v12366 = vadd.f32 %v12105, %v12171
  %v12367 = vadd.f32 %v12106, %v12175
  %v12368 = vadd.f32 %v12107, %v12179
  %v12369 = vadd.f32 %v12108, %v12155
  %v12370 = vadd.f32 %v12109, %v12159
  %v12371 = vadd.f32 %v12110, %v12163
  %v12372 = vadd.f32 %v12111, %v12167
  %v12373 = vadd.f32 %v12112, %v12171
  %v12374 = vadd.f32 %v12113, %v12175
  %v12375 = vadd.f32 %v12114, %v12179
  %v12376 = vadd.f32 %v12115, %v12155
  %v12377 = vadd.f32 %v12116, %v12159
  %v12378 = vadd.f32 %v12117, %v12163
  %v12379 = vadd.f32 %v12118, %v12167
  %v12380 = vadd.f32 %v12119, %v12171
  %v12381 = vadd.f32 %v12120, %v12175
  %v12382 = vadd.f32 %v12121, %v12179
  %v12383 = vadd.f32 %v12122, %v12155
  %v12384 = vadd.f32 %v12123, %v12159
  %v12385 = vadd.f32 %v12124, %v12163
  %v12386 = vadd.f32 %v12125, %v12167
  %v12387 = vadd.f32 %v12126, %v12171
  %v12388 = vadd.f32 %v12127, %v12175
  %v12389 = vadd.f32 %v12128, %v12179
  %v12390 = vadd.f32 %v12129, %v12155
  %v12391 = vadd.f32 %v12130, %v12159
  %v12392 = vadd.f32 %v12131, %v12163
  %v12393 = vadd.f32 %v12132, %v12167
  %v12394 = vadd.f32 %v12133, %v12171
  %v12395 = vadd.f32 %v12134, %v12175
  %v12396 = vadd.f32 %v12135, %v12179
  %v12397 = vadd.f32 %v12136, %v12155
  %v12398 = vadd.f32 %v12137, %v12159
  %v12399 = vadd.f32 %v12138, %v12163
  %v12400 = vadd.f32 %v12139, %v12167
  %v12401 = vadd.f32 %v12140, %v12171
  %v12402 = vadd.f32 %v12141, %v12175
  %v12403 = vadd.f32 %v12142, %v12179
  %v12404 = vadd.f32 %v12143, %v12155
  %v12405 = vadd.f32 %v12144, %v12159
  %v12406 = vadd.f32 %v12145, %v12163
  %v12407 = vadd.f32 %v12146, %v12167
  %v12408 = vadd.f32 %v12147, %v12171
  %v12409 = vadd.f32 %v12148, %v12175
  %v12410 = vadd.f32 %v12149, %v12179
  %v12411 = vtanh.pop %v12187
  %v12412 = vtanh.pop %v12188
  %v12413 = vtanh.pop %v12189
  %v12414 = vtanh.pop %v12190
  %v12415 = vtanh.pop %v12191
  %v12416 = vtanh.pop %v12192
  %v12417 = vtanh.pop %v12193
  %v12418 = vtanh.pop %v12194
  %v12419 = vtanh.pop %v12195
  %v12420 = vtanh.pop %v12196
  %v12421 = vtanh.pop %v12197
  %v12422 = vtanh.pop %v12198
  %v12423 = vtanh.pop %v12199
  %v12424 = vtanh.pop %v12200
  %v12425 = vtanh.pop %v12201
  %v12426 = vtanh.pop %v12202
  %v12427 = vtanh.pop %v12203
  %v12428 = vtanh.pop %v12204
  %v12429 = vtanh.pop %v12205
  %v12430 = vtanh.pop %v12206
  %v12431 = vtanh.pop %v12207
  %v12432 = vtanh.pop %v12208
  %v12433 = vtanh.pop %v12209
  %v12434 = vtanh.pop %v12210
  %v12435 = vtanh.pop %v12211
  %v12436 = vtanh.pop %v12212
  %v12437 = vtanh.pop %v12213
  %v12438 = vtanh.pop %v12214
  %v12439 = vtanh.pop %v12215
  %v12440 = vtanh.pop %v12216
  %v12441 = vtanh.pop %v12217
  %v12442 = vtanh.pop %v12218
  %v12443 = vtanh.pop %v12219
  %v12444 = vtanh.pop %v12220
  %v12445 = vtanh.pop %v12221
  %v12446 = vtanh.pop %v12222
  %v12447 = vtanh.pop %v12223
  %v12448 = vtanh.pop %v12224
  %v12449 = vtanh.pop %v12225
  %v12450 = vtanh.pop %v12226
  %v12451 = vtanh.pop %v12227
  %v12452 = vtanh.pop %v12228
  %v12453 = vtanh.pop %v12229
  %v12454 = vtanh.pop %v12230
  %v12455 = vtanh.pop %v12231
  %v12456 = vtanh.pop %v12232
  %v12457 = vtanh.pop %v12233
  %v12458 = vtanh.pop %v12234
  %v12459 = vtanh.pop %v12235
  %v12460 = vtanh.pop %v12236
  %v12461 = vtanh.pop %v12237
  %v12462 = vtanh.pop %v12238
  %v12463 = vtanh.pop %v12239
  %v12464 = vtanh.pop %v12240
  %v12465 = vtanh.pop %v12241
  %v12466 = vtanh.pop %v12242
  %v12467 = vtanh.pop %v12243
  %v12468 = vtanh.pop %v12244
  %v12469 = vtanh.pop %v12245
  %v12470 = vtanh.pop %v12246
  %v12471 = vtanh.pop %v12247
  %v12472 = vtanh.pop %v12248
  %v12473 = vtanh.pop %v12249
  %v12474 = vtanh.pop %v12250
  %v12475 = vtanh.pop %v12251
  %v12476 = vtanh.pop %v12252
  %v12477 = vtanh.pop %v12253
  %v12478 = vtanh.pop %v12254
  %v12479 = vtanh.pop %v12255
  %v12480 = vtanh.pop %v12256
  %v12481 = vtanh.pop %v12257
  %v12482 = vtanh.pop %v12258
  %v12483 = vtanh.pop %v12259
  %v12484 = vtanh.pop %v12260
  %v12485 = vtanh.pop %v12261
  %v12486 = vtanh.pop %v12262
  %v12487 = vtanh.pop %v12263
  %v12488 = vtanh.pop %v12264
  %v12489 = vtanh.pop %v12265
  %v12490 = vtanh.pop %v12266
  %v12491 = vtanh.pop %v12267
  %v12492 = vtanh.pop %v12268
  %v12493 = vtanh.pop %v12269
  %v12494 = vtanh.pop %v12270
  %v12495 = vtanh.pop %v12271
  %v12496 = vtanh.pop %v12272
  %v12497 = vtanh.pop %v12273
  %v12498 = vtanh.pop %v12274
  %v12499 = vtanh.pop %v12275
  %v12500 = vtanh.pop %v12276
  %v12501 = vtanh.pop %v12277
  %v12502 = vtanh.pop %v12278
  %v12503 = vtanh.pop %v12279
  %v12504 = vtanh.pop %v12280
  %v12505 = vtanh.pop %v12281
  %v12506 = vtanh.pop %v12282
  %v12507 = vtanh.pop %v12283
  %v12508 = vtanh.pop %v12284
  %v12509 = vtanh.pop %v12285
  %v12510 = vtanh.pop %v12286
  %v12511 = vtanh.pop %v12287
  %v12512 = vtanh.pop %v12288
  %v12513 = vtanh.pop %v12289
  %v12514 = vtanh.pop %v12290
  %v12515 = vtanh.pop %v12291
  %v12516 = vtanh.pop %v12292
  %v12517 = vtanh.pop %v12293
  %v12518 = vtanh.pop %v12294
  %v12519 = vtanh.pop %v12295
  %v12520 = vtanh.pop %v12296
  %v12521 = vtanh.pop %v12297
  %v12522 = vtanh.pop %v12298
  %v12523 = vtanh.pop %v12299
  %v12524 = vtanh.pop %v12300
  %v12525 = vtanh.pop %v12301
  %v12526 = vtanh.pop %v12302
  %v12527 = vtanh.pop %v12303
  %v12528 = vtanh.pop %v12304
  %v12529 = vtanh.pop %v12305
  %v12530 = vtanh.pop %v12306
  %v12531 = vtanh.pop %v12307
  %v12532 = vtanh.pop %v12308
  %v12533 = vtanh.pop %v12309
  %v12534 = vtanh.pop %v12310
  %v12535 = vtanh.pop %v12311
  %v12536 = vtanh.pop %v12312
  %v12537 = vtanh.pop %v12313
  %v12538 = vtanh.pop %v12314
  %v12539 = vtanh.pop %v12315
  %v12540 = vtanh.pop %v12316
  %v12541 = vtanh.pop %v12317
  %v12542 = vtanh.pop %v12318
  %v12543 = vtanh.pop %v12319
  %v12544 = vtanh.pop %v12320
  %v12545 = vtanh.pop %v12321
  %v12546 = vtanh.pop %v12322
  %v12547 = vtanh.pop %v12323
  %v12548 = vtanh.pop %v12324
  %v12549 = vtanh.pop %v12325
  %v12550 = vtanh.pop %v12326
  %v12551 = vtanh.pop %v12327
  %v12552 = vtanh.pop %v12328
  %v12553 = vtanh.pop %v12329
  %v12554 = vtanh.pop %v12330
  %v12555 = vtanh.pop %v12331
  %v12556 = vtanh.pop %v12332
  %v12557 = vtanh.pop %v12333
  %v12558 = vtanh.pop %v12334
  %v12559 = vtanh.pop %v12335
  %v12560 = vtanh.pop %v12336
  %v12561 = vtanh.pop %v12337
  %v12562 = vtanh.pop %v12338
  %v12563 = vtanh.pop %v12339
  %v12564 = vtanh.pop %v12340
  %v12565 = vtanh.pop %v12341
  %v12566 = vtanh.pop %v12342
  %v12567 = vtanh.pop %v12343
  %v12568 = vtanh.pop %v12344
  %v12569 = vtanh.pop %v12345
  %v12570 = vtanh.pop %v12346
  %v12571 = vtanh.pop %v12347
  %v12572 = vtanh.pop %v12348
  %v12573 = vtanh.pop %v12349
  %v12574 = vtanh.pop %v12350
  %v12575 = vtanh.pop %v12351
  %v12576 = vtanh.pop %v12352
  %v12577 = vtanh.pop %v12353
  %v12578 = vtanh.pop %v12354
  %v12579 = vtanh.pop %v12355
  %v12580 = vtanh.pop %v12356
  %v12581 = vtanh.pop %v12357
  %v12582 = vtanh.pop %v12358
  %v12583 = vtanh.pop %v12359
  %v12584 = vtanh.pop %v12360
  %v12585 = vtanh.pop %v12361
  %v12586 = vtanh.pop %v12362
  %v12587 = vtanh.pop %v12363
  %v12588 = vtanh.pop %v12364
  %v12589 = vtanh.pop %v12365
  %v12590 = vtanh.pop %v12366
  %v12591 = vtanh.pop %v12367
  %v12592 = vtanh.pop %v12368
  %v12593 = vtanh.pop %v12369
  %v12594 = vtanh.pop %v12370
  %v12595 = vtanh.pop %v12371
  %v12596 = vtanh.pop %v12372
  %v12597 = vtanh.pop %v12373
  %v12598 = vtanh.pop %v12374
  %v12599 = vtanh.pop %v12375
  %v12600 = vtanh.pop %v12376
  %v12601 = vtanh.pop %v12377
  %v12602 = vtanh.pop %v12378
  %v12603 = vtanh.pop %v12379
  %v12604 = vtanh.pop %v12380
  %v12605 = vtanh.pop %v12381
  %v12606 = vtanh.pop %v12382
  %v12607 = vtanh.pop %v12383
  %v12608 = vtanh.pop %v12384
  %v12609 = vtanh.pop %v12385
  %v12610 = vtanh.pop %v12386
  %v12611 = vtanh.pop %v12387
  %v12612 = vtanh.pop %v12388
  %v12613 = vtanh.pop %v12389
  %v12614 = vtanh.pop %v12390
  %v12615 = vtanh.pop %v12391
  %v12616 = vtanh.pop %v12392
  %v12617 = vtanh.pop %v12393
  %v12618 = vtanh.pop %v12394
  %v12619 = vtanh.pop %v12395
  %v12620 = vtanh.pop %v12396
  %v12621 = vtanh.pop %v12397
  %v12622 = vtanh.pop %v12398
  %v12623 = vtanh.pop %v12399
  %v12624 = vtanh.pop %v12400
  %v12625 = vtanh.pop %v12401
  %v12626 = vtanh.pop %v12402
  %v12627 = vtanh.pop %v12403
  %v12628 = vtanh.pop %v12404
  %v12629 = vtanh.pop %v12405
  %v12630 = vtanh.pop %v12406
  %v12631 = vtanh.pop %v12407
  %v12632 = vtanh.pop %v12408
  %v12633 = vtanh.pop %v12409
  %v12634 = vtanh.pop %v12410
  %12635 = vst [vmem:[%s16] sm:$0xff] %v12411
  %12636 = vst [vmem:[%s16 + $0x8] sm:$0xff] %v12412
  %12637 = vst [vmem:[%s16 + $0x10] sm:$0xff] %v12413
  %12638 = vst [vmem:[%s16 + $0x18] sm:$0xff] %v12414
  %12639 = vst [vmem:[%s16 + $0x20] sm:$0xff] %v12415
  %12640 = vst [vmem:[%s16 + $0x28] sm:$0xff] %v12416
  %vm12641 = vcmask 130048
  %12642 = vst.msk [vmem:[%s16 + $0x30] sm:$0xff] %vm12641, %v12417
  %12643 = vst [vmem:[%s16 + $0x38] sm:$0xff] %v12418
  %12644 = vst [vmem:[%s16 + $0x40] sm:$0xff] %v12419
  %12645 = vst [vmem:[%s16 + $0x48] sm:$0xff] %v12420
  %12646 = vst [vmem:[%s16 + $0x50] sm:$0xff] %v12421
  %12647 = vst [vmem:[%s16 + $0x58] sm:$0xff] %v12422
  %12648 = vst [vmem:[%s16 + $0x60] sm:$0xff] %v12423
  %12649 = vst.msk [vmem:[%s16 + $0x68] sm:$0xff] %vm12641, %v12424
  %12650 = vst [vmem:[%s16 + $0x70] sm:$0xff] %v12425
  %12651 = vst [vmem:[%s16 + $0x78] sm:$0xff] %v12426
  %12652 = vst [vmem:[%s16 + $0x80] sm:$0xff] %v12427
  %12653 = vst [vmem:[%s16 + $0x88] sm:$0xff] %v12428
  %12654 = vst [vmem:[%s16 + $0x90] sm:$0xff] %v12429
  %12655 = vst [vmem:[%s16 + $0x98] sm:$0xff] %v12430
  %12656 = vst.msk [vmem:[%s16 + $0xa0] sm:$0xff] %vm12641, %v12431
  %12657 = vst [vmem:[%s16 + $0xa8] sm:$0xff] %v12432
  %12658 = vst [vmem:[%s16 + $0xb0] sm:$0xff] %v12433
  %12659 = vst [vmem:[%s16 + $0xb8] sm:$0xff] %v12434
  %12660 = vst [vmem:[%s16 + $0xc0] sm:$0xff] %v12435
  %12661 = vst [vmem:[%s16 + $0xc8] sm:$0xff] %v12436
  %12662 = vst [vmem:[%s16 + $0xd0] sm:$0xff] %v12437
  %12663 = vst.msk [vmem:[%s16 + $0xd8] sm:$0xff] %vm12641, %v12438
  %12664 = vst [vmem:[%s16 + $0xe0] sm:$0xff] %v12439
  %12665 = vst [vmem:[%s16 + $0xe8] sm:$0xff] %v12440
  %12666 = vst [vmem:[%s16 + $0xf0] sm:$0xff] %v12441
  %12667 = vst [vmem:[%s16 + $0xf8] sm:$0xff] %v12442
  %12668 = vst [vmem:[%s16 + $0x100] sm:$0xff] %v12443
  %12669 = vst [vmem:[%s16 + $0x108] sm:$0xff] %v12444
  %12670 = vst.msk [vmem:[%s16 + $0x110] sm:$0xff] %vm12641, %v12445
  %12671 = vst [vmem:[%s16 + $0x118] sm:$0xff] %v12446
  %12672 = vst [vmem:[%s16 + $0x120] sm:$0xff] %v12447
  %12673 = vst [vmem:[%s16 + $0x128] sm:$0xff] %v12448
  %12674 = vst [vmem:[%s16 + $0x130] sm:$0xff] %v12449
  %12675 = vst [vmem:[%s16 + $0x138] sm:$0xff] %v12450
  %12676 = vst [vmem:[%s16 + $0x140] sm:$0xff] %v12451
  %12677 = vst.msk [vmem:[%s16 + $0x148] sm:$0xff] %vm12641, %v12452
  %12678 = vst [vmem:[%s16 + $0x150] sm:$0xff] %v12453
  %12679 = vst [vmem:[%s16 + $0x158] sm:$0xff] %v12454
  %12680 = vst [vmem:[%s16 + $0x160] sm:$0xff] %v12455
  %12681 = vst [vmem:[%s16 + $0x168] sm:$0xff] %v12456
  %12682 = vst [vmem:[%s16 + $0x170] sm:$0xff] %v12457
  %12683 = vst [vmem:[%s16 + $0x178] sm:$0xff] %v12458
  %12684 = vst.msk [vmem:[%s16 + $0x180] sm:$0xff] %vm12641, %v12459
  %12685 = vst [vmem:[%s16 + $0x188] sm:$0xff] %v12460
  %12686 = vst [vmem:[%s16 + $0x190] sm:$0xff] %v12461
  %12687 = vst [vmem:[%s16 + $0x198] sm:$0xff] %v12462
  %12688 = vst [vmem:[%s16 + $0x1a0] sm:$0xff] %v12463
  %12689 = vst [vmem:[%s16 + $0x1a8] sm:$0xff] %v12464
  %12690 = vst [vmem:[%s16 + $0x1b0] sm:$0xff] %v12465
  %12691 = vst.msk [vmem:[%s16 + $0x1b8] sm:$0xff] %vm12641, %v12466
  %12692 = vst [vmem:[%s16 + $0x1c0] sm:$0xff] %v12467
  %12693 = vst [vmem:[%s16 + $0x1c8] sm:$0xff] %v12468
  %12694 = vst [vmem:[%s16 + $0x1d0] sm:$0xff] %v12469
  %12695 = vst [vmem:[%s16 + $0x1d8] sm:$0xff] %v12470
  %12696 = vst [vmem:[%s16 + $0x1e0] sm:$0xff] %v12471
  %12697 = vst [vmem:[%s16 + $0x1e8] sm:$0xff] %v12472
  %12698 = vst.msk [vmem:[%s16 + $0x1f0] sm:$0xff] %vm12641, %v12473
  %12699 = vst [vmem:[%s16 + $0x1f8] sm:$0xff] %v12474
  %12700 = vst [vmem:[%s16 + $0x200] sm:$0xff] %v12475
  %12701 = vst [vmem:[%s16 + $0x208] sm:$0xff] %v12476
  %12702 = vst [vmem:[%s16 + $0x210] sm:$0xff] %v12477
  %12703 = vst [vmem:[%s16 + $0x218] sm:$0xff] %v12478
  %12704 = vst [vmem:[%s16 + $0x220] sm:$0xff] %v12479
  %12705 = vst.msk [vmem:[%s16 + $0x228] sm:$0xff] %vm12641, %v12480
  %12706 = vst [vmem:[%s16 + $0x230] sm:$0xff] %v12481
  %12707 = vst [vmem:[%s16 + $0x238] sm:$0xff] %v12482
  %12708 = vst [vmem:[%s16 + $0x240] sm:$0xff] %v12483
  %12709 = vst [vmem:[%s16 + $0x248] sm:$0xff] %v12484
  %12710 = vst [vmem:[%s16 + $0x250] sm:$0xff] %v12485
  %12711 = vst [vmem:[%s16 + $0x258] sm:$0xff] %v12486
  %12712 = vst.msk [vmem:[%s16 + $0x260] sm:$0xff] %vm12641, %v12487
  %12713 = vst [vmem:[%s16 + $0x268] sm:$0xff] %v12488
  %12714 = vst [vmem:[%s16 + $0x270] sm:$0xff] %v12489
  %12715 = vst [vmem:[%s16 + $0x278] sm:$0xff] %v12490
  %12716 = vst [vmem:[%s16 + $0x280] sm:$0xff] %v12491
  %12717 = vst [vmem:[%s16 + $0x288] sm:$0xff] %v12492
  %12718 = vst [vmem:[%s16 + $0x290] sm:$0xff] %v12493
  %12719 = vst.msk [vmem:[%s16 + $0x298] sm:$0xff] %vm12641, %v12494
  %12720 = vst [vmem:[%s16 + $0x2a0] sm:$0xff] %v12495
  %12721 = vst [vmem:[%s16 + $0x2a8] sm:$0xff] %v12496
  %12722 = vst [vmem:[%s16 + $0x2b0] sm:$0xff] %v12497
  %12723 = vst [vmem:[%s16 + $0x2b8] sm:$0xff] %v12498
  %12724 = vst [vmem:[%s16 + $0x2c0] sm:$0xff] %v12499
  %12725 = vst [vmem:[%s16 + $0x2c8] sm:$0xff] %v12500
  %12726 = vst.msk [vmem:[%s16 + $0x2d0] sm:$0xff] %vm12641, %v12501
  %12727 = vst [vmem:[%s16 + $0x2d8] sm:$0xff] %v12502
  %12728 = vst [vmem:[%s16 + $0x2e0] sm:$0xff] %v12503
  %12729 = vst [vmem:[%s16 + $0x2e8] sm:$0xff] %v12504
  %12730 = vst [vmem:[%s16 + $0x2f0] sm:$0xff] %v12505
  %12731 = vst [vmem:[%s16 + $0x2f8] sm:$0xff] %v12506
  %12732 = vst [vmem:[%s16 + $0x300] sm:$0xff] %v12507
  %12733 = vst.msk [vmem:[%s16 + $0x308] sm:$0xff] %vm12641, %v12508
  %12734 = vst [vmem:[%s16 + $0x310] sm:$0xff] %v12509
  %12735 = vst [vmem:[%s16 + $0x318] sm:$0xff] %v12510
  %12736 = vst [vmem:[%s16 + $0x320] sm:$0xff] %v12511
  %12737 = vst [vmem:[%s16 + $0x328] sm:$0xff] %v12512
  %12738 = vst [vmem:[%s16 + $0x330] sm:$0xff] %v12513
  %12739 = vst [vmem:[%s16 + $0x338] sm:$0xff] %v12514
  %12740 = vst.msk [vmem:[%s16 + $0x340] sm:$0xff] %vm12641, %v12515
  %12741 = vst [vmem:[%s16 + $0x348] sm:$0xff] %v12516
  %12742 = vst [vmem:[%s16 + $0x350] sm:$0xff] %v12517
  %12743 = vst [vmem:[%s16 + $0x358] sm:$0xff] %v12518
  %12744 = vst [vmem:[%s16 + $0x360] sm:$0xff] %v12519
  %12745 = vst [vmem:[%s16 + $0x368] sm:$0xff] %v12520
  %12746 = vst [vmem:[%s16 + $0x370] sm:$0xff] %v12521
  %12747 = vst.msk [vmem:[%s16 + $0x378] sm:$0xff] %vm12641, %v12522
  %12748 = vst [vmem:[%s16 + $0x380] sm:$0xff] %v12523
  %12749 = vst [vmem:[%s16 + $0x388] sm:$0xff] %v12524
  %12750 = vst [vmem:[%s16 + $0x390] sm:$0xff] %v12525
  %12751 = vst [vmem:[%s16 + $0x398] sm:$0xff] %v12526
  %12752 = vst [vmem:[%s16 + $0x3a0] sm:$0xff] %v12527
  %12753 = vst [vmem:[%s16 + $0x3a8] sm:$0xff] %v12528
  %12754 = vst.msk [vmem:[%s16 + $0x3b0] sm:$0xff] %vm12641, %v12529
  %12755 = vst [vmem:[%s16 + $0x3b8] sm:$0xff] %v12530
  %12756 = vst [vmem:[%s16 + $0x3c0] sm:$0xff] %v12531
  %12757 = vst [vmem:[%s16 + $0x3c8] sm:$0xff] %v12532
  %12758 = vst [vmem:[%s16 + $0x3d0] sm:$0xff] %v12533
  %12759 = vst [vmem:[%s16 + $0x3d8] sm:$0xff] %v12534
  %12760 = vst [vmem:[%s16 + $0x3e0] sm:$0xff] %v12535
  %12761 = vst.msk [vmem:[%s16 + $0x3e8] sm:$0xff] %vm12641, %v12536
  %12762 = vst [vmem:[%s16 + $0x3f0] sm:$0xff] %v12537
  %12763 = vst [vmem:[%s16 + $0x3f8] sm:$0xff] %v12538
  %12764 = vst [vmem:[%s16 + $0x400] sm:$0xff] %v12539
  %12765 = vst [vmem:[%s16 + $0x408] sm:$0xff] %v12540
  %12766 = vst [vmem:[%s16 + $0x410] sm:$0xff] %v12541
  %12767 = vst [vmem:[%s16 + $0x418] sm:$0xff] %v12542
  %12768 = vst.msk [vmem:[%s16 + $0x420] sm:$0xff] %vm12641, %v12543
  %12769 = vst [vmem:[%s16 + $0x428] sm:$0xff] %v12544
  %12770 = vst [vmem:[%s16 + $0x430] sm:$0xff] %v12545
  %12771 = vst [vmem:[%s16 + $0x438] sm:$0xff] %v12546
  %12772 = vst [vmem:[%s16 + $0x440] sm:$0xff] %v12547
  %12773 = vst [vmem:[%s16 + $0x448] sm:$0xff] %v12548
  %12774 = vst [vmem:[%s16 + $0x450] sm:$0xff] %v12549
  %12775 = vst.msk [vmem:[%s16 + $0x458] sm:$0xff] %vm12641, %v12550
  %12776 = vst [vmem:[%s16 + $0x460] sm:$0xff] %v12551
  %12777 = vst [vmem:[%s16 + $0x468] sm:$0xff] %v12552
  %12778 = vst [vmem:[%s16 + $0x470] sm:$0xff] %v12553
  %12779 = vst [vmem:[%s16 + $0x478] sm:$0xff] %v12554
  %12780 = vst [vmem:[%s16 + $0x480] sm:$0xff] %v12555
  %12781 = vst [vmem:[%s16 + $0x488] sm:$0xff] %v12556
  %12782 = vst.msk [vmem:[%s16 + $0x490] sm:$0xff] %vm12641, %v12557
  %12783 = vst [vmem:[%s16 + $0x498] sm:$0xff] %v12558
  %12784 = vst [vmem:[%s16 + $0x4a0] sm:$0xff] %v12559
  %12785 = vst [vmem:[%s16 + $0x4a8] sm:$0xff] %v12560
  %12786 = vst [vmem:[%s16 + $0x4b0] sm:$0xff] %v12561
  %12787 = vst [vmem:[%s16 + $0x4b8] sm:$0xff] %v12562
  %12788 = vst [vmem:[%s16 + $0x4c0] sm:$0xff] %v12563
  %12789 = vst.msk [vmem:[%s16 + $0x4c8] sm:$0xff] %vm12641, %v12564
  %12790 = vst [vmem:[%s16 + $0x4d0] sm:$0xff] %v12565
  %12791 = vst [vmem:[%s16 + $0x4d8] sm:$0xff] %v12566
  %12792 = vst [vmem:[%s16 + $0x4e0] sm:$0xff] %v12567
  %12793 = vst [vmem:[%s16 + $0x4e8] sm:$0xff] %v12568
  %12794 = vst [vmem:[%s16 + $0x4f0] sm:$0xff] %v12569
  %12795 = vst [vmem:[%s16 + $0x4f8] sm:$0xff] %v12570
  %12796 = vst.msk [vmem:[%s16 + $0x500] sm:$0xff] %vm12641, %v12571
  %12797 = vst [vmem:[%s16 + $0x508] sm:$0xff] %v12572
  %12798 = vst [vmem:[%s16 + $0x510] sm:$0xff] %v12573
  %12799 = vst [vmem:[%s16 + $0x518] sm:$0xff] %v12574
  %12800 = vst [vmem:[%s16 + $0x520] sm:$0xff] %v12575
  %12801 = vst [vmem:[%s16 + $0x528] sm:$0xff] %v12576
  %12802 = vst [vmem:[%s16 + $0x530] sm:$0xff] %v12577
  %12803 = vst.msk [vmem:[%s16 + $0x538] sm:$0xff] %vm12641, %v12578
  %12804 = vst [vmem:[%s16 + $0x540] sm:$0xff] %v12579
  %12805 = vst [vmem:[%s16 + $0x548] sm:$0xff] %v12580
  %12806 = vst [vmem:[%s16 + $0x550] sm:$0xff] %v12581
  %12807 = vst [vmem:[%s16 + $0x558] sm:$0xff] %v12582
  %12808 = vst [vmem:[%s16 + $0x560] sm:$0xff] %v12583
  %12809 = vst [vmem:[%s16 + $0x568] sm:$0xff] %v12584
  %12810 = vst.msk [vmem:[%s16 + $0x570] sm:$0xff] %vm12641, %v12585
  %12811 = vst [vmem:[%s16 + $0x578] sm:$0xff] %v12586
  %12812 = vst [vmem:[%s16 + $0x580] sm:$0xff] %v12587
  %12813 = vst [vmem:[%s16 + $0x588] sm:$0xff] %v12588
  %12814 = vst [vmem:[%s16 + $0x590] sm:$0xff] %v12589
  %12815 = vst [vmem:[%s16 + $0x598] sm:$0xff] %v12590
  %12816 = vst [vmem:[%s16 + $0x5a0] sm:$0xff] %v12591
  %12817 = vst.msk [vmem:[%s16 + $0x5a8] sm:$0xff] %vm12641, %v12592
  %12818 = vst [vmem:[%s16 + $0x5b0] sm:$0xff] %v12593
  %12819 = vst [vmem:[%s16 + $0x5b8] sm:$0xff] %v12594
  %12820 = vst [vmem:[%s16 + $0x5c0] sm:$0xff] %v12595
  %12821 = vst [vmem:[%s16 + $0x5c8] sm:$0xff] %v12596
  %12822 = vst [vmem:[%s16 + $0x5d0] sm:$0xff] %v12597
  %12823 = vst [vmem:[%s16 + $0x5d8] sm:$0xff] %v12598
  %12824 = vst.msk [vmem:[%s16 + $0x5e0] sm:$0xff] %vm12641, %v12599
  %12825 = vst [vmem:[%s16 + $0x5e8] sm:$0xff] %v12600
  %12826 = vst [vmem:[%s16 + $0x5f0] sm:$0xff] %v12601
  %12827 = vst [vmem:[%s16 + $0x5f8] sm:$0xff] %v12602
  %12828 = vst [vmem:[%s16 + $0x600] sm:$0xff] %v12603
  %12829 = vst [vmem:[%s16 + $0x608] sm:$0xff] %v12604
  %12830 = vst [vmem:[%s16 + $0x610] sm:$0xff] %v12605
  %12831 = vst.msk [vmem:[%s16 + $0x618] sm:$0xff] %vm12641, %v12606
  %12832 = vst [vmem:[%s16 + $0x620] sm:$0xff] %v12607
  %12833 = vst [vmem:[%s16 + $0x628] sm:$0xff] %v12608
  %12834 = vst [vmem:[%s16 + $0x630] sm:$0xff] %v12609
  %12835 = vst [vmem:[%s16 + $0x638] sm:$0xff] %v12610
  %12836 = vst [vmem:[%s16 + $0x640] sm:$0xff] %v12611
  %12837 = vst [vmem:[%s16 + $0x648] sm:$0xff] %v12612
  %12838 = vst.msk [vmem:[%s16 + $0x650] sm:$0xff] %vm12641, %v12613
  %12839 = vst [vmem:[%s16 + $0x658] sm:$0xff] %v12614
  %12840 = vst [vmem:[%s16 + $0x660] sm:$0xff] %v12615
  %12841 = vst [vmem:[%s16 + $0x668] sm:$0xff] %v12616
  %12842 = vst [vmem:[%s16 + $0x670] sm:$0xff] %v12617
  %12843 = vst [vmem:[%s16 + $0x678] sm:$0xff] %v12618
  %12844 = vst [vmem:[%s16 + $0x680] sm:$0xff] %v12619
  %12845 = vst.msk [vmem:[%s16 + $0x688] sm:$0xff] %vm12641, %v12620
  %12846 = vst [vmem:[%s16 + $0x690] sm:$0xff] %v12621
  %12847 = vst [vmem:[%s16 + $0x698] sm:$0xff] %v12622
  %12848 = vst [vmem:[%s16 + $0x6a0] sm:$0xff] %v12623
  %12849 = vst [vmem:[%s16 + $0x6a8] sm:$0xff] %v12624
  %12850 = vst [vmem:[%s16 + $0x6b0] sm:$0xff] %v12625
  %12851 = vst [vmem:[%s16 + $0x6b8] sm:$0xff] %v12626
  %12852 = vst.msk [vmem:[%s16 + $0x6c0] sm:$0xff] %vm12641, %v12627
  %12853 = vst [vmem:[%s16 + $0x6c8] sm:$0xff] %v12628
  %12854 = vst [vmem:[%s16 + $0x6d0] sm:$0xff] %v12629
  %12855 = vst [vmem:[%s16 + $0x6d8] sm:$0xff] %v12630
  %12856 = vst [vmem:[%s16 + $0x6e0] sm:$0xff] %v12631
  %12857 = vst [vmem:[%s16 + $0x6e8] sm:$0xff] %v12632
  %12858 = vst [vmem:[%s16 + $0x6f0] sm:$0xff] %v12633
  %12859 = vst.msk [vmem:[%s16 + $0x6f8] sm:$0xff] %vm12641, %v12634
  // Predicated region
  $region66: #{tpu_custom_call.1} parent=0 // pred_check
    _
  $region67: #{tpu_custom_call.1} parent=0 // pred_check_branch
    %12861 = sbr.rel (0) target = $region69
  $region68: #{tpu_custom_call.1} parent=0 // pred_region
    _
  $region69: #{tpu_custom_call.1} parent=0 // pred_fallthru
    _
  // Predicated region
  $region70: #{tpu_custom_call.1} parent=0 // pred_check
    _
  $region71: #{tpu_custom_call.1} parent=0 // pred_check_branch
    %12863 = sbr.rel (0) target = $region73
  $region72: #{tpu_custom_call.1} parent=0 // pred_region
    _
  $region73: #{tpu_custom_call.1} parent=0 // pred_fallthru
    _

</llo_original>
